<compile_context>
chip_gen: v7x
topology: tpu7x:2x2x1
jax: 0.10.0
libtpu: 0.0.40
codegen_flags: <defaults>
</compile_context>

<pallas_src>
import functools

import jax
import jax.numpy as jnp
from jax.experimental import pallas as pl
from jax.experimental.pallas import tpu as pltpu


# ---------------------------------------------------------------------------
# Pallas kernels
# ---------------------------------------------------------------------------
def _mm_bias_kernel(x_ref, w_ref, b_ref, o_ref, *, apply_relu):
    """out = [relu](x @ w + b); x/w are bf16, accumulation and bias in f32."""
    acc = jnp.dot(x_ref[...], w_ref[...], preferred_element_type=jnp.float32)
    acc = acc + b_ref[...]                       # (1, N) broadcast over rows
    if apply_relu:
        acc = jnp.maximum(acc, 0.0)
    o_ref[...] = acc.astype(o_ref.dtype)


def _conv3x3_s2_kernel(p_ref, w_ref, b_ref, o_ref):
    """3x3 stride-2 conv + bias + ReLU from parity planes of the padded input.

    p_ref : (4, B, Ho+1, Wo+1, Cin) f32 parity planes,
            plane[(ph*2+pw), b, r, c, :] == x_pad[b, 2r+ph, 2c+pw, :]
    w_ref : (9, Cin, Cout) bf16, tap index t = kh*3 + kw
    b_ref : (1, Cout) f32
    o_ref : (B*Ho*Wo, Cout) f32, rows ordered (b, i, j)
    """
    _, batch, hp2, wp2, cin = p_ref.shape
    ho, wo = hp2 - 1, wp2 - 1
    cout = w_ref.shape[2]
    m = batch * ho * wo

    acc = jnp.zeros((m, cout), jnp.float32)
    for kh in range(3):
        for kw in range(3):
            # x_pad[b, 2i+kh, 2j+kw, :] == plane[kh%2, kw%2][b, i+kh//2, j+kw//2, :]
            tap = p_ref[(kh % 2) * 2 + (kw % 2), :,
                        kh // 2:kh // 2 + ho,
                        kw // 2:kw // 2 + wo, :]                 # (B, Ho, Wo, Cin)
            lhs = tap.reshape(m, cin).astype(jnp.bfloat16)       # lane-dense rows
            acc = acc + jnp.dot(lhs, w_ref[kh * 3 + kw],
                                preferred_element_type=jnp.float32)
    acc = acc + b_ref[...]
    o_ref[...] = jnp.maximum(acc, 0.0).astype(o_ref.dtype)


# ---------------------------------------------------------------------------
# pallas_call wrappers (whole operands resident in VMEM, single grid point)
# ---------------------------------------------------------------------------
def _vmem_specs(n):
    return [pl.BlockSpec(memory_space=pltpu.MemorySpace.VMEM)] * n


def _nbytes(*arrays):
    return int(sum(a.size * a.dtype.itemsize for a in arrays))


def matmul_bias(x, w, b, *, apply_relu):
    """x: (M, K) bf16, w: (K, N) bf16, b: (1, N) f32 -> (M, N) f32."""
    m, k = x.shape
    n = w.shape[1]
    cost = pl.CostEstimate(flops=2 * m * k * n, transcendentals=0,
                           bytes_accessed=_nbytes(x, w, b) + m * n * 4)
    return pl.pallas_call(
        functools.partial(_mm_bias_kernel, apply_relu=apply_relu),
        out_shape=jax.ShapeDtypeStruct((m, n), jnp.float32),
        in_specs=_vmem_specs(3),
        out_specs=pl.BlockSpec(memory_space=pltpu.MemorySpace.VMEM),
        cost_estimate=cost,
    )(x, w, b)


def conv3x3_s2(planes, w, b):
    """planes: (4, B, Ho+1, Wo+1, Cin) f32, w: (9, Cin, Cout) bf16, b: (1, Cout)."""
    _, batch, hp2, wp2, cin = planes.shape
    ho, wo = hp2 - 1, wp2 - 1
    cout = w.shape[2]
    m = batch * ho * wo
    cost = pl.CostEstimate(flops=2 * m * 9 * cin * cout, transcendentals=0,
                           bytes_accessed=_nbytes(planes, w, b) + m * cout * 4)
    return pl.pallas_call(
        _conv3x3_s2_kernel,
        out_shape=jax.ShapeDtypeStruct((m, cout), jnp.float32),
        in_specs=_vmem_specs(3),
        out_specs=pl.BlockSpec(memory_space=pltpu.MemorySpace.VMEM),
        cost_estimate=cost,
    )(planes, w, b)


# ---------------------------------------------------------------------------
# Cheap XLA glue (pure layout: pad / parity split / tiny im2col). No MACs here.
# ---------------------------------------------------------------------------
def _pad_hw(x):
    return jnp.pad(x, ((0, 0), (1, 1), (1, 1), (0, 0)))


def _parity_planes(xpad):
    # (B, Hp, Wp, C) -> (4, B, Hp//2, Wp//2, C); plane[(ph*2+pw)] = xpad[:, ph::2, pw::2, :]
    return jnp.stack([xpad[:, ph::2, pw::2, :]
                      for ph in (0, 1) for pw in (0, 1)], axis=0)


def _im2col_s1(xpad):
    # stride-1 3x3 patches; only used for conv1 (Cin=4 -> tiny patch tensor).
    b, hp, wp, c = xpad.shape
    h, w = hp - 2, wp - 2
    cols = [xpad[:, kh:kh + h, kw:kw + w, :]
            for kh in range(3) for kw in range(3)]
    return jnp.concatenate(cols, axis=-1).reshape(b * h * w, 9 * c)


def _im2col_s2(xpad):
    # stride-2 3x3 patches; only used for conv4 (4x4 output -> tiny patch tensor).
    b, hp, wp, c = xpad.shape
    ho, wo = (hp - 2) // 2, (wp - 2) // 2
    cols = [xpad[:, kh:kh + 2 * ho:2, kw:kw + 2 * wo:2, :]
            for kh in range(3) for kw in range(3)]
    return jnp.concatenate(cols, axis=-1).reshape(b * ho * wo, 9 * c)


# ---------------------------------------------------------------------------
# Parameters: torch-layout init + one-time kernel-layout preparation
# ---------------------------------------------------------------------------
def _uniform(key, shape, bound):
    return jax.random.uniform(key, shape, jnp.float32, -bound, bound)


def init_params(key, channels, z_dim):
    ks = jax.random.split(key, 12)
    p = {}

    def conv_init(kw_key, kb_key, cin, cout):
        fan_in = cin * 3 * 3
        bound = 1.0 / (fan_in ** 0.5)
        return (_uniform(kw_key, (cout, cin, 3, 3), bound),
                _uniform(kb_key, (cout,), bound))

    p["w1"], p["b1"] = conv_init(ks[0], ks[1], channels, 32)
    p["w2"], p["b2"] = conv_init(ks[2], ks[3], 32, 64)
    p["w3"], p["b3"] = conv_init(ks[4], ks[5], 64, 128)
    p["w4"], p["b4"] = conv_init(ks[6], ks[7], 128, 256)

    fan_in = 4 * 4 * 256
    bound = 1.0 / (fan_in ** 0.5)
    # stored (in, out); row index follows PyTorch's (C, H, W) flatten order
    p["wfc1"] = _uniform(ks[8], (fan_in, z_dim), bound)
    p["bfc1"] = _uniform(ks[9], (z_dim,), bound)
    p["wfc2"] = _uniform(ks[10], (fan_in, z_dim), bound)
    p["bfc2"] = _uniform(ks[11], (z_dim,), bound)
    return p


def prepare_params(params):
    """One-time conversion of torch-layout params into kernel-friendly layouts."""
    def conv_mat(w):                      # OIHW -> (kh*kw*Cin, Cout)
        co, ci, kh, kw = w.shape
        return jnp.transpose(w, (2, 3, 1, 0)).reshape(kh * kw * ci, co)

    def conv_tap_stack(w):                # OIHW -> (9, Cin, Cout), t = kh*3+kw
        co, ci, kh, kw = w.shape
        return jnp.transpose(w, (2, 3, 1, 0)).reshape(kh * kw, ci, co)

    bf = lambda a: a.astype(jnp.bfloat16)
    row = lambda b: b.reshape(1, -1).astype(jnp.float32)

    # fc1|fc2 fused into one (4096, 2z) weight; rows permuted from PyTorch's
    # (c, h, w) flatten order to the kernel's (h, w, c) order so no runtime
    # transpose of the activations is needed.
    wfc = jnp.concatenate([params["wfc1"], params["wfc2"]], axis=1)     # (4096, 2z)
    z2 = wfc.shape[1]
    wfc = wfc.reshape(256, 16, z2).transpose(1, 0, 2).reshape(16 * 256, z2)

    return {
        "w1": bf(conv_mat(params["w1"])), "b1": row(params["b1"]),
        "w2": bf(conv_tap_stack(params["w2"])), "b2": row(params["b2"]),
        "w3": bf(conv_tap_stack(params["w3"])), "b3": row(params["b3"]),
        "w4": bf(conv_mat(params["w4"])), "b4": row(params["b4"]),
        "wfc": bf(wfc),
        "bfc": jnp.concatenate([params["bfc1"], params["bfc2"]]
                               ).reshape(1, -1).astype(jnp.float32),
    }


# ---------------------------------------------------------------------------
# Encoder forward (matches PyTorch module semantics; expects 32x32 input)
# ---------------------------------------------------------------------------
def encoder_forward(prep, x_nchw):
    batch = x_nchw.shape[0]
    x = jnp.transpose(x_nchw, (0, 2, 3, 1))                      # NCHW -> NHWC

    # conv1 (stride 1): tiny im2col (Cin=4) in XLA + one fused kernel.
    p1 = _im2col_s1(_pad_hw(x)).astype(jnp.bfloat16)             # (B*1024, 36)
    y1 = matmul_bias(p1, prep["w1"], prep["b1"], apply_relu=True)
    y1 = y1.reshape(batch, 32, 32, 32)

    # conv2 / conv3 (stride 2): 9 in-kernel taps from parity planes.
    y2 = conv3x3_s2(_parity_planes(_pad_hw(y1)), prep["w2"], prep["b2"])
    y2 = y2.reshape(batch, 16, 16, 64)
    y3 = conv3x3_s2(_parity_planes(_pad_hw(y2)), prep["w3"], prep["b3"])
    y3 = y3.reshape(batch, 8, 8, 128)

    # conv4 (stride 2, 4x4 output): tiny im2col in XLA + one fused kernel.
    p4 = _im2col_s2(_pad_hw(y3)).astype(jnp.bfloat16)            # (B*16, 1152)
    y4 = matmul_bias(p4, prep["w4"], prep["b4"], apply_relu=True)  # (B*16, 256)

    # fused fc1 | fc2 (weight rows pre-permuted to this flatten order).
    flat = y4.reshape(batch, 16 * 256).astype(jnp.bfloat16)
    out = matmul_bias(flat, prep["wfc"], prep["bfc"], apply_relu=False)  # (B, 2z)
    z = out.shape[1] // 2
    return out[:, :z], out[:, z:]


# ---------------------------------------------------------------------------
# Pure-JAX f32 reference (torch-layout params) for a numerical sanity check
# ---------------------------------------------------------------------------
def _ref_forward(params, x_nchw):
    def conv(x, w, b, stride):
        y = jax.lax.conv_general_dilated(
            x, w, window_strides=(stride, stride), padding=((1, 1), (1, 1)),
            dimension_numbers=("NCHW", "OIHW", "NCHW"))
        return jax.nn.relu(y + b[None, :, None, None])

    x = conv(x_nchw, params["w1"], params["b1"], 1)
    x = conv(x, params["w2"], params["b2"], 2)
    x = conv(x, params["w3"], params["b3"], 2)
    x = conv(x, params["w4"], params["b4"], 2)
    flat = x.reshape(x.shape[0], -1)
    mu = flat @ params["wfc1"] + params["bfc1"]
    logvar = flat @ params["wfc2"] + params["bfc2"]
    return mu, logvar


if __name__ == "__main__":
    key = jax.random.PRNGKey(0)
    k_param, k_x = jax.random.split(key)

    batch, channels, spatial, z_dim = 2, 4, 32, 32   # spatial=32 -> 4*4*256 flatten
    params = init_params(k_param, channels, z_dim)
    prep = prepare_params(params)                    # one-time kernel layouts
    x = jax.random.normal(k_x, (batch, channels, spatial, spatial), jnp.float32)

    fwd = jax.jit(encoder_forward)
    mu, logvar = fwd(prep, x)
    jax.block_until_ready((mu, logvar))

    mu_ref, logvar_ref = _ref_forward(params, x)
    assert mu.shape == (batch, z_dim) and logvar.shape == (batch, z_dim)

    # bf16 matmul operands vs f32 reference: scale-normalized error check.
    scale = float(jnp.max(jnp.abs(jnp.concatenate([mu_ref, logvar_ref], -1))))
    tol = 0.1 * scale + 1e-5
    err_mu = float(jnp.max(jnp.abs(mu - mu_ref)))
    err_lv = float(jnp.max(jnp.abs(logvar - logvar_ref)))
    assert err_mu <= tol, f"mu mismatch: {err_mu} > {tol}"
    assert err_lv <= tol, f"logvar mismatch: {err_lv} > {tol}"

    print("KERNEL_OK")
</pallas_src>

<mosaic_0001>
module attributes {stable_mosaic.version = 11 : i64} {
  func.func @_mm_bias_kernel(%arg0: memref<2048x36xbf16, #tpu.memory_space<vmem>>, %arg1: memref<36x32xbf16, #tpu.memory_space<vmem>>, %arg2: memref<1x32xf32, #tpu.memory_space<vmem>>, %arg3: memref<2048x32xf32, #tpu.memory_space<vmem>>) attributes {dimension_semantics = [], scalar_prefetch = 0 : i64, scratch_operands = 0 : i64, tpu.core_type = #tpu.core_type<tc>} {
    %c0 = arith.constant 0 : index
    %c0_0 = arith.constant 0 : index
    %0 = vector.load %arg0[%c0, %c0_0] : memref<2048x36xbf16, #tpu.memory_space<vmem>>, vector<2048x36xbf16>
    %c0_1 = arith.constant 0 : index
    %c0_2 = arith.constant 0 : index
    %1 = vector.load %arg1[%c0_1, %c0_2] : memref<36x32xbf16, #tpu.memory_space<vmem>>, vector<36x32xbf16>
    %cst = arith.constant dense<0.000000e+00> : vector<2048x32xf32>
    %2 = tpu.matmul %0, %1, %cst {dimension_numbers = #tpu.dot_dimension_numbers<[1], [0], [0], [1], [0, 0, 1, 1], [], []>} : vector<2048x36xbf16>, vector<36x32xbf16>, vector<2048x32xf32> -> vector<2048x32xf32>
    %c0_3 = arith.constant 0 : index
    %c0_4 = arith.constant 0 : index
    %3 = vector.load %arg2[%c0_3, %c0_4] : memref<1x32xf32, #tpu.memory_space<vmem>>, vector<1x32xf32>
    %4 = vector.broadcast %3 : vector<1x32xf32> to vector<2048x32xf32>
    %5 = arith.addf %2, %4 : vector<2048x32xf32>
    %cst_5 = arith.constant 0.000000e+00 : f32
    %6 = vector.broadcast %cst_5 : f32 to vector<2048x32xf32>
    %7 = arith.maximumf %5, %6 : vector<2048x32xf32>
    %c0_6 = arith.constant 0 : index
    %c0_7 = arith.constant 0 : index
    %8 = vector.load %arg3[%c0_6, %c0_7] : memref<2048x32xf32, #tpu.memory_space<vmem>>, vector<2048x32xf32>
    tpu.vector_store %arg3[%c0_6, %c0_7], %7 {strides = array<i32>} : memref<2048x32xf32, #tpu.memory_space<vmem>>, vector<2048x32xf32>,
    return
  }
}

module attributes {stable_mosaic.version = 11 : i64} {
  func.func @_conv3x3_s2_kernel(%arg0: memref<4x2x17x17x32xf32, #tpu.memory_space<vmem>>, %arg1: memref<9x32x64xbf16, #tpu.memory_space<vmem>>, %arg2: memref<1x64xf32, #tpu.memory_space<vmem>>, %arg3: memref<512x64xf32, #tpu.memory_space<vmem>>) attributes {dimension_semantics = [], scalar_prefetch = 0 : i64, scratch_operands = 0 : i64, tpu.core_type = #tpu.core_type<tc>} {
    %cst = arith.constant 0.000000e+00 : f32
    %0 = vector.broadcast %cst : f32 to vector<512x64xf32>
    %c0 = arith.constant 0 : index
    %c0_0 = arith.constant 0 : index
    %c0_1 = arith.constant 0 : index
    %c0_2 = arith.constant 0 : index
    %c0_3 = arith.constant 0 : index
    %1 = vector.load %arg0[%c0, %c0_0, %c0_1, %c0_2, %c0_3] : memref<4x2x17x17x32xf32, #tpu.memory_space<vmem>>, vector<1x2x16x16x32xf32>
    %2 = vector.shape_cast %1 : vector<1x2x16x16x32xf32> to vector<2x16x16x32xf32>
    %3 = vector.shape_cast %2 : vector<2x16x16x32xf32> to vector<512x32xf32>
    %4 = arith.truncf %3 : vector<512x32xf32> to vector<512x32xbf16>
    %c0_4 = arith.constant 0 : index
    %c0_5 = arith.constant 0 : index
    %c0_6 = arith.constant 0 : index
    %5 = vector.load %arg1[%c0_4, %c0_5, %c0_6] : memref<9x32x64xbf16, #tpu.memory_space<vmem>>, vector<1x32x64xbf16>
    %6 = vector.shape_cast %5 : vector<1x32x64xbf16> to vector<32x64xbf16>
    %cst_7 = arith.constant dense<0.000000e+00> : vector<512x64xf32>
    %7 = tpu.matmul %4, %6, %cst_7 {dimension_numbers = #tpu.dot_dimension_numbers<[1], [0], [0], [1], [0, 0, 1, 1], [], []>} : vector<512x32xbf16>, vector<32x64xbf16>, vector<512x64xf32> -> vector<512x64xf32>
    %8 = arith.addf %0, %7 : vector<512x64xf32>
    %c1 = arith.constant 1 : index
    %c0_8 = arith.constant 0 : index
    %c0_9 = arith.constant 0 : index
    %c0_10 = arith.constant 0 : index
    %c0_11 = arith.constant 0 : index
    %9 = vector.load %arg0[%c1, %c0_8, %c0_9, %c0_10, %c0_11] : memref<4x2x17x17x32xf32, #tpu.memory_space<vmem>>, vector<1x2x16x16x32xf32>
    %10 = vector.shape_cast %9 : vector<1x2x16x16x32xf32> to vector<2x16x16x32xf32>
    %11 = vector.shape_cast %10 : vector<2x16x16x32xf32> to vector<512x32xf32>
    %12 = arith.truncf %11 : vector<512x32xf32> to vector<512x32xbf16>
    %c1_12 = arith.constant 1 : index
    %c0_13 = arith.constant 0 : index
    %c0_14 = arith.constant 0 : index
    %13 = vector.load %arg1[%c1_12, %c0_13, %c0_14] : memref<9x32x64xbf16, #tpu.memory_space<vmem>>, vector<1x32x64xbf16>
    %14 = vector.shape_cast %13 : vector<1x32x64xbf16> to vector<32x64xbf16>
    %cst_15 = arith.constant dense<0.000000e+00> : vector<512x64xf32>
    %15 = tpu.matmul %12, %14, %cst_15 {dimension_numbers = #tpu.dot_dimension_numbers<[1], [0], [0], [1], [0, 0, 1, 1], [], []>} : vector<512x32xbf16>, vector<32x64xbf16>, vector<512x64xf32> -> vector<512x64xf32>
    %16 = arith.addf %8, %15 : vector<512x64xf32>
    %c0_16 = arith.constant 0 : index
    %c0_17 = arith.constant 0 : index
    %c0_18 = arith.constant 0 : index
    %c1_19 = arith.constant 1 : index
    %c0_20 = arith.constant 0 : index
    %17 = vector.load %arg0[%c0_16, %c0_17, %c0_18, %c1_19, %c0_20] : memref<4x2x17x17x32xf32, #tpu.memory_space<vmem>>, vector<1x2x16x16x32xf32>
    %18 = vector.shape_cast %17 : vector<1x2x16x16x32xf32> to vector<2x16x16x32xf32>
    %19 = vector.shape_cast %18 : vector<2x16x16x32xf32> to vector<512x32xf32>
    %20 = arith.truncf %19 : vector<512x32xf32> to vector<512x32xbf16>
    %c2 = arith.constant 2 : index
    %c0_21 = arith.constant 0 : index
    %c0_22 = arith.constant 0 : index
    %21 = vector.load %arg1[%c2, %c0_21, %c0_22] : memref<9x32x64xbf16, #tpu.memory_space<vmem>>, vector<1x32x64xbf16>
    %22 = vector.shape_cast %21 : vector<1x32x64xbf16> to vector<32x64xbf16>
    %cst_23 = arith.constant dense<0.000000e+00> : vector<512x64xf32>
    %23 = tpu.matmul %20, %22, %cst_23 {dimension_numbers = #tpu.dot_dimension_numbers<[1], [0], [0], [1], [0, 0, 1, 1], [], []>} : vector<512x32xbf16>, vector<32x64xbf16>, vector<512x64xf32> -> vector<512x64xf32>
    %24 = arith.addf %16, %23 : vector<512x64xf32>
    %c2_24 = arith.constant 2 : index
    %c0_25 = arith.constant 0 : index
    %c0_26 = arith.constant 0 : index
    %c0_27 = arith.constant 0 : index
    %c0_28 = arith.constant 0 : index
    %25 = vector.load %arg0[%c2_24, %c0_25, %c0_26, %c0_27, %c0_28] : memref<4x2x17x17x32xf32, #tpu.memory_space<vmem>>, vector<1x2x16x16x32xf32>
    %26 = vector.shape_cast %25 : vector<1x2x16x16x32xf32> to vector<2x16x16x32xf32>
    %27 = vector.shape_cast %26 : vector<2x16x16x32xf32> to vector<512x32xf32>
    %28 = arith.truncf %27 : vector<512x32xf32> to vector<512x32xbf16>
    %c3 = arith.constant 3 : index
    %c0_29 = arith.constant 0 : index
    %c0_30 = arith.constant 0 : index
    %29 = vector.load %arg1[%c3, %c0_29, %c0_30] : memref<9x32x64xbf16, #tpu.memory_space<vmem>>, vector<1x32x64xbf16>
    %30 = vector.shape_cast %29 : vector<1x32x64xbf16> to vector<32x64xbf16>
    %cst_31 = arith.constant dense<0.000000e+00> : vector<512x64xf32>
    %31 = tpu.matmul %28, %30, %cst_31 {dimension_numbers = #tpu.dot_dimension_numbers<[1], [0], [0], [1], [0, 0, 1, 1], [], []>} : vector<512x32xbf16>, vector<32x64xbf16>, vector<512x64xf32> -> vector<512x64xf32>
    %32 = arith.addf %24, %31 : vector<512x64xf32>
    %c3_32 = arith.constant 3 : index
    %c0_33 = arith.constant 0 : index
    %c0_34 = arith.constant 0 : index
    %c0_35 = arith.constant 0 : index
    %c0_36 = arith.constant 0 : index
    %33 = vector.load %arg0[%c3_32, %c0_33, %c0_34, %c0_35, %c0_36] : memref<4x2x17x17x32xf32, #tpu.memory_space<vmem>>, vector<1x2x16x16x32xf32>
    %34 = vector.shape_cast %33 : vector<1x2x16x16x32xf32> to vector<2x16x16x32xf32>
    %35 = vector.shape_cast %34 : vector<2x16x16x32xf32> to vector<512x32xf32>
    %36 = arith.truncf %35 : vector<512x32xf32> to vector<512x32xbf16>
    %c4 = arith.constant 4 : index
    %c0_37 = arith.constant 0 : index
    %c0_38 = arith.constant 0 : index
    %37 = vector.load %arg1[%c4, %c0_37, %c0_38] : memref<9x32x64xbf16, #tpu.memory_space<vmem>>, vector<1x32x64xbf16>
    %38 = vector.shape_cast %37 : vector<1x32x64xbf16> to vector<32x64xbf16>
    %cst_39 = arith.constant dense<0.000000e+00> : vector<512x64xf32>
    %39 = tpu.matmul %36, %38, %cst_39 {dimension_numbers = #tpu.dot_dimension_numbers<[1], [0], [0], [1], [0, 0, 1, 1], [], []>} : vector<512x32xbf16>, vector<32x64xbf16>, vector<512x64xf32> -> vector<512x64xf32>
    %40 = arith.addf %32, %39 : vector<512x64xf32>
    %c2_40 = arith.constant 2 : index
    %c0_41 = arith.constant 0 : index
    %c0_42 = arith.constant 0 : index
    %c1_43 = arith.constant 1 : index
    %c0_44 = arith.constant 0 : index
    %41 = vector.load %arg0[%c2_40, %c0_41, %c0_42, %c1_43, %c0_44] : memref<4x2x17x17x32xf32, #tpu.memory_space<vmem>>, vector<1x2x16x16x32xf32>
    %42 = vector.shape_cast %41 : vector<1x2x16x16x32xf32> to vector<2x16x16x32xf32>
    %43 = vector.shape_cast %42 : vector<2x16x16x32xf32> to vector<512x32xf32>
    %44 = arith.truncf %43 : vector<512x32xf32> to vector<512x32xbf16>
    %c5 = arith.constant 5 : index
    %c0_45 = arith.constant 0 : index
    %c0_46 = arith.constant 0 : index
    %45 = vector.load %arg1[%c5, %c0_45, %c0_46] : memref<9x32x64xbf16, #tpu.memory_space<vmem>>, vector<1x32x64xbf16>
    %46 = vector.shape_cast %45 : vector<1x32x64xbf16> to vector<32x64xbf16>
    %cst_47 = arith.constant dense<0.000000e+00> : vector<512x64xf32>
    %47 = tpu.matmul %44, %46, %cst_47 {dimension_numbers = #tpu.dot_dimension_numbers<[1], [0], [0], [1], [0, 0, 1, 1], [], []>} : vector<512x32xbf16>, vector<32x64xbf16>, vector<512x64xf32> -> vector<512x64xf32>
    %48 = arith.addf %40, %47 : vector<512x64xf32>
    %c0_48 = arith.constant 0 : index
    %c0_49 = arith.constant 0 : index
    %c1_50 = arith.constant 1 : index
    %c0_51 = arith.constant 0 : index
    %c0_52 = arith.constant 0 : index
    %49 = vector.load %arg0[%c0_48, %c0_49, %c1_50, %c0_51, %c0_52] : memref<4x2x17x17x32xf32, #tpu.memory_space<vmem>>, vector<1x2x16x16x32xf32>
    %50 = vector.shape_cast %49 : vector<1x2x16x16x32xf32> to vector<2x16x16x32xf32>
    %51 = vector.shape_cast %50 : vector<2x16x16x32xf32> to vector<512x32xf32>
    %52 = arith.truncf %51 : vector<512x32xf32> to vector<512x32xbf16>
    %c6 = arith.constant 6 : index
    %c0_53 = arith.constant 0 : index
    %c0_54 = arith.constant 0 : index
    %53 = vector.load %arg1[%c6, %c0_53, %c0_54] : memref<9x32x64xbf16, #tpu.memory_space<vmem>>, vector<1x32x64xbf16>
    %54 = vector.shape_cast %53 : vector<1x32x64xbf16> to vector<32x64xbf16>
    %cst_55 = arith.constant dense<0.000000e+00> : vector<512x64xf32>
    %55 = tpu.matmul %52, %54, %cst_55 {dimension_numbers = #tpu.dot_dimension_numbers<[1], [0], [0], [1], [0, 0, 1, 1], [], []>} : vector<512x32xbf16>, vector<32x64xbf16>, vector<512x64xf32> -> vector<512x64xf32>
    %56 = arith.addf %48, %55 : vector<512x64xf32>
    %c1_56 = arith.constant 1 : index
    %c0_57 = arith.constant 0 : index
    %c1_58 = arith.constant 1 : index
    %c0_59 = arith.constant 0 : index
    %c0_60 = arith.constant 0 : index
    %57 = vector.load %arg0[%c1_56, %c0_57, %c1_58, %c0_59, %c0_60] : memref<4x2x17x17x32xf32, #tpu.memory_space<vmem>>, vector<1x2x16x16x32xf32>
    %58 = vector.shape_cast %57 : vector<1x2x16x16x32xf32> to vector<2x16x16x32xf32>
    %59 = vector.shape_cast %58 : vector<2x16x16x32xf32> to vector<512x32xf32>
    %60 = arith.truncf %59 : vector<512x32xf32> to vector<512x32xbf16>
    %c7 = arith.constant 7 : index
    %c0_61 = arith.constant 0 : index
    %c0_62 = arith.constant 0 : index
    %61 = vector.load %arg1[%c7, %c0_61, %c0_62] : memref<9x32x64xbf16, #tpu.memory_space<vmem>>, vector<1x32x64xbf16>
    %62 = vector.shape_cast %61 : vector<1x32x64xbf16> to vector<32x64xbf16>
    %cst_63 = arith.constant dense<0.000000e+00> : vector<512x64xf32>
    %63 = tpu.matmul %60, %62, %cst_63 {dimension_numbers = #tpu.dot_dimension_numbers<[1], [0], [0], [1], [0, 0, 1, 1], [], []>} : vector<512x32xbf16>, vector<32x64xbf16>, vector<512x64xf32> -> vector<512x64xf32>
    %64 = arith.addf %56, %63 : vector<512x64xf32>
    %c0_64 = arith.constant 0 : index
    %c0_65 = arith.constant 0 : index
    %c1_66 = arith.constant 1 : index
    %c1_67 = arith.constant 1 : index
    %c0_68 = arith.constant 0 : index
    %65 = vector.load %arg0[%c0_64, %c0_65, %c1_66, %c1_67, %c0_68] : memref<4x2x17x17x32xf32, #tpu.memory_space<vmem>>, vector<1x2x16x16x32xf32>
    %66 = vector.shape_cast %65 : vector<1x2x16x16x32xf32> to vector<2x16x16x32xf32>
    %67 = vector.shape_cast %66 : vector<2x16x16x32xf32> to vector<512x32xf32>
    %68 = arith.truncf %67 : vector<512x32xf32> to vector<512x32xbf16>
    %c8 = arith.constant 8 : index
    %c0_69 = arith.constant 0 : index
    %c0_70 = arith.constant 0 : index
    %69 = vector.load %arg1[%c8, %c0_69, %c0_70] : memref<9x32x64xbf16, #tpu.memory_space<vmem>>, vector<1x32x64xbf16>
    %70 = vector.shape_cast %69 : vector<1x32x64xbf16> to vector<32x64xbf16>
    %cst_71 = arith.constant dense<0.000000e+00> : vector<512x64xf32>
    %71 = tpu.matmul %68, %70, %cst_71 {dimension_numbers = #tpu.dot_dimension_numbers<[1], [0], [0], [1], [0, 0, 1, 1], [], []>} : vector<512x32xbf16>, vector<32x64xbf16>, vector<512x64xf32> -> vector<512x64xf32>
    %72 = arith.addf %64, %71 : vector<512x64xf32>
    %c0_72 = arith.constant 0 : index
    %c0_73 = arith.constant 0 : index
    %73 = vector.load %arg2[%c0_72, %c0_73] : memref<1x64xf32, #tpu.memory_space<vmem>>, vector<1x64xf32>
    %74 = vector.broadcast %73 : vector<1x64xf32> to vector<512x64xf32>
    %75 = arith.addf %72, %74 : vector<512x64xf32>
    %cst_74 = arith.constant 0.000000e+00 : f32
    %76 = vector.broadcast %cst_74 : f32 to vector<512x64xf32>
    %77 = arith.maximumf %75, %76 : vector<512x64xf32>
    %c0_75 = arith.constant 0 : index
    %c0_76 = arith.constant 0 : index
    %78 = vector.load %arg3[%c0_75, %c0_76] : memref<512x64xf32, #tpu.memory_space<vmem>>, vector<512x64xf32>
    tpu.vector_store %arg3[%c0_75, %c0_76], %77 {strides = array<i32>} : memref<512x64xf32, #tpu.memory_space<vmem>>, vector<512x64xf32>,
    return
  }
}

module attributes {stable_mosaic.version = 11 : i64} {
  func.func @_conv3x3_s2_kernel(%arg0: memref<4x2x9x9x64xf32, #tpu.memory_space<vmem>>, %arg1: memref<9x64x128xbf16, #tpu.memory_space<vmem>>, %arg2: memref<1x128xf32, #tpu.memory_space<vmem>>, %arg3: memref<128x128xf32, #tpu.memory_space<vmem>>) attributes {dimension_semantics = [], scalar_prefetch = 0 : i64, scratch_operands = 0 : i64, tpu.core_type = #tpu.core_type<tc>} {
    %cst = arith.constant 0.000000e+00 : f32
    %0 = vector.broadcast %cst : f32 to vector<128x128xf32>
    %c0 = arith.constant 0 : index
    %c0_0 = arith.constant 0 : index
    %c0_1 = arith.constant 0 : index
    %c0_2 = arith.constant 0 : index
    %c0_3 = arith.constant 0 : index
    %1 = vector.load %arg0[%c0, %c0_0, %c0_1, %c0_2, %c0_3] : memref<4x2x9x9x64xf32, #tpu.memory_space<vmem>>, vector<1x2x8x8x64xf32>
    %2 = vector.shape_cast %1 : vector<1x2x8x8x64xf32> to vector<2x8x8x64xf32>
    %3 = vector.shape_cast %2 : vector<2x8x8x64xf32> to vector<128x64xf32>
    %4 = arith.truncf %3 : vector<128x64xf32> to vector<128x64xbf16>
    %c0_4 = arith.constant 0 : index
    %c0_5 = arith.constant 0 : index
    %c0_6 = arith.constant 0 : index
    %5 = vector.load %arg1[%c0_4, %c0_5, %c0_6] : memref<9x64x128xbf16, #tpu.memory_space<vmem>>, vector<1x64x128xbf16>
    %6 = vector.shape_cast %5 : vector<1x64x128xbf16> to vector<64x128xbf16>
    %cst_7 = arith.constant dense<0.000000e+00> : vector<128x128xf32>
    %7 = tpu.matmul %4, %6, %cst_7 {dimension_numbers = #tpu.dot_dimension_numbers<[1], [0], [0], [1], [0, 0, 1, 1], [], []>} : vector<128x64xbf16>, vector<64x128xbf16>, vector<128x128xf32> -> vector<128x128xf32>
    %8 = arith.addf %0, %7 : vector<128x128xf32>
    %c1 = arith.constant 1 : index
    %c0_8 = arith.constant 0 : index
    %c0_9 = arith.constant 0 : index
    %c0_10 = arith.constant 0 : index
    %c0_11 = arith.constant 0 : index
    %9 = vector.load %arg0[%c1, %c0_8, %c0_9, %c0_10, %c0_11] : memref<4x2x9x9x64xf32, #tpu.memory_space<vmem>>, vector<1x2x8x8x64xf32>
    %10 = vector.shape_cast %9 : vector<1x2x8x8x64xf32> to vector<2x8x8x64xf32>
    %11 = vector.shape_cast %10 : vector<2x8x8x64xf32> to vector<128x64xf32>
    %12 = arith.truncf %11 : vector<128x64xf32> to vector<128x64xbf16>
    %c1_12 = arith.constant 1 : index
    %c0_13 = arith.constant 0 : index
    %c0_14 = arith.constant 0 : index
    %13 = vector.load %arg1[%c1_12, %c0_13, %c0_14] : memref<9x64x128xbf16, #tpu.memory_space<vmem>>, vector<1x64x128xbf16>
    %14 = vector.shape_cast %13 : vector<1x64x128xbf16> to vector<64x128xbf16>
    %cst_15 = arith.constant dense<0.000000e+00> : vector<128x128xf32>
    %15 = tpu.matmul %12, %14, %cst_15 {dimension_numbers = #tpu.dot_dimension_numbers<[1], [0], [0], [1], [0, 0, 1, 1], [], []>} : vector<128x64xbf16>, vector<64x128xbf16>, vector<128x128xf32> -> vector<128x128xf32>
    %16 = arith.addf %8, %15 : vector<128x128xf32>
    %c0_16 = arith.constant 0 : index
    %c0_17 = arith.constant 0 : index
    %c0_18 = arith.constant 0 : index
    %c1_19 = arith.constant 1 : index
    %c0_20 = arith.constant 0 : index
    %17 = vector.load %arg0[%c0_16, %c0_17, %c0_18, %c1_19, %c0_20] : memref<4x2x9x9x64xf32, #tpu.memory_space<vmem>>, vector<1x2x8x8x64xf32>
    %18 = vector.shape_cast %17 : vector<1x2x8x8x64xf32> to vector<2x8x8x64xf32>
    %19 = vector.shape_cast %18 : vector<2x8x8x64xf32> to vector<128x64xf32>
    %20 = arith.truncf %19 : vector<128x64xf32> to vector<128x64xbf16>
    %c2 = arith.constant 2 : index
    %c0_21 = arith.constant 0 : index
    %c0_22 = arith.constant 0 : index
    %21 = vector.load %arg1[%c2, %c0_21, %c0_22] : memref<9x64x128xbf16, #tpu.memory_space<vmem>>, vector<1x64x128xbf16>
    %22 = vector.shape_cast %21 : vector<1x64x128xbf16> to vector<64x128xbf16>
    %cst_23 = arith.constant dense<0.000000e+00> : vector<128x128xf32>
    %23 = tpu.matmul %20, %22, %cst_23 {dimension_numbers = #tpu.dot_dimension_numbers<[1], [0], [0], [1], [0, 0, 1, 1], [], []>} : vector<128x64xbf16>, vector<64x128xbf16>, vector<128x128xf32> -> vector<128x128xf32>
    %24 = arith.addf %16, %23 : vector<128x128xf32>
    %c2_24 = arith.constant 2 : index
    %c0_25 = arith.constant 0 : index
    %c0_26 = arith.constant 0 : index
    %c0_27 = arith.constant 0 : index
    %c0_28 = arith.constant 0 : index
    %25 = vector.load %arg0[%c2_24, %c0_25, %c0_26, %c0_27, %c0_28] : memref<4x2x9x9x64xf32, #tpu.memory_space<vmem>>, vector<1x2x8x8x64xf32>
    %26 = vector.shape_cast %25 : vector<1x2x8x8x64xf32> to vector<2x8x8x64xf32>
    %27 = vector.shape_cast %26 : vector<2x8x8x64xf32> to vector<128x64xf32>
    %28 = arith.truncf %27 : vector<128x64xf32> to vector<128x64xbf16>
    %c3 = arith.constant 3 : index
    %c0_29 = arith.constant 0 : index
    %c0_30 = arith.constant 0 : index
    %29 = vector.load %arg1[%c3, %c0_29, %c0_30] : memref<9x64x128xbf16, #tpu.memory_space<vmem>>, vector<1x64x128xbf16>
    %30 = vector.shape_cast %29 : vector<1x64x128xbf16> to vector<64x128xbf16>
    %cst_31 = arith.constant dense<0.000000e+00> : vector<128x128xf32>
    %31 = tpu.matmul %28, %30, %cst_31 {dimension_numbers = #tpu.dot_dimension_numbers<[1], [0], [0], [1], [0, 0, 1, 1], [], []>} : vector<128x64xbf16>, vector<64x128xbf16>, vector<128x128xf32> -> vector<128x128xf32>
    %32 = arith.addf %24, %31 : vector<128x128xf32>
    %c3_32 = arith.constant 3 : index
    %c0_33 = arith.constant 0 : index
    %c0_34 = arith.constant 0 : index
    %c0_35 = arith.constant 0 : index
    %c0_36 = arith.constant 0 : index
    %33 = vector.load %arg0[%c3_32, %c0_33, %c0_34, %c0_35, %c0_36] : memref<4x2x9x9x64xf32, #tpu.memory_space<vmem>>, vector<1x2x8x8x64xf32>
    %34 = vector.shape_cast %33 : vector<1x2x8x8x64xf32> to vector<2x8x8x64xf32>
    %35 = vector.shape_cast %34 : vector<2x8x8x64xf32> to vector<128x64xf32>
    %36 = arith.truncf %35 : vector<128x64xf32> to vector<128x64xbf16>
    %c4 = arith.constant 4 : index
    %c0_37 = arith.constant 0 : index
    %c0_38 = arith.constant 0 : index
    %37 = vector.load %arg1[%c4, %c0_37, %c0_38] : memref<9x64x128xbf16, #tpu.memory_space<vmem>>, vector<1x64x128xbf16>
    %38 = vector.shape_cast %37 : vector<1x64x128xbf16> to vector<64x128xbf16>
    %cst_39 = arith.constant dense<0.000000e+00> : vector<128x128xf32>
    %39 = tpu.matmul %36, %38, %cst_39 {dimension_numbers = #tpu.dot_dimension_numbers<[1], [0], [0], [1], [0, 0, 1, 1], [], []>} : vector<128x64xbf16>, vector<64x128xbf16>, vector<128x128xf32> -> vector<128x128xf32>
    %40 = arith.addf %32, %39 : vector<128x128xf32>
    %c2_40 = arith.constant 2 : index
    %c0_41 = arith.constant 0 : index
    %c0_42 = arith.constant 0 : index
    %c1_43 = arith.constant 1 : index
    %c0_44 = arith.constant 0 : index
    %41 = vector.load %arg0[%c2_40, %c0_41, %c0_42, %c1_43, %c0_44] : memref<4x2x9x9x64xf32, #tpu.memory_space<vmem>>, vector<1x2x8x8x64xf32>
    %42 = vector.shape_cast %41 : vector<1x2x8x8x64xf32> to vector<2x8x8x64xf32>
    %43 = vector.shape_cast %42 : vector<2x8x8x64xf32> to vector<128x64xf32>
    %44 = arith.truncf %43 : vector<128x64xf32> to vector<128x64xbf16>
    %c5 = arith.constant 5 : index
    %c0_45 = arith.constant 0 : index
    %c0_46 = arith.constant 0 : index
    %45 = vector.load %arg1[%c5, %c0_45, %c0_46] : memref<9x64x128xbf16, #tpu.memory_space<vmem>>, vector<1x64x128xbf16>
    %46 = vector.shape_cast %45 : vector<1x64x128xbf16> to vector<64x128xbf16>
    %cst_47 = arith.constant dense<0.000000e+00> : vector<128x128xf32>
    %47 = tpu.matmul %44, %46, %cst_47 {dimension_numbers = #tpu.dot_dimension_numbers<[1], [0], [0], [1], [0, 0, 1, 1], [], []>} : vector<128x64xbf16>, vector<64x128xbf16>, vector<128x128xf32> -> vector<128x128xf32>
    %48 = arith.addf %40, %47 : vector<128x128xf32>
    %c0_48 = arith.constant 0 : index
    %c0_49 = arith.constant 0 : index
    %c1_50 = arith.constant 1 : index
    %c0_51 = arith.constant 0 : index
    %c0_52 = arith.constant 0 : index
    %49 = vector.load %arg0[%c0_48, %c0_49, %c1_50, %c0_51, %c0_52] : memref<4x2x9x9x64xf32, #tpu.memory_space<vmem>>, vector<1x2x8x8x64xf32>
    %50 = vector.shape_cast %49 : vector<1x2x8x8x64xf32> to vector<2x8x8x64xf32>
    %51 = vector.shape_cast %50 : vector<2x8x8x64xf32> to vector<128x64xf32>
    %52 = arith.truncf %51 : vector<128x64xf32> to vector<128x64xbf16>
    %c6 = arith.constant 6 : index
    %c0_53 = arith.constant 0 : index
    %c0_54 = arith.constant 0 : index
    %53 = vector.load %arg1[%c6, %c0_53, %c0_54] : memref<9x64x128xbf16, #tpu.memory_space<vmem>>, vector<1x64x128xbf16>
    %54 = vector.shape_cast %53 : vector<1x64x128xbf16> to vector<64x128xbf16>
    %cst_55 = arith.constant dense<0.000000e+00> : vector<128x128xf32>
    %55 = tpu.matmul %52, %54, %cst_55 {dimension_numbers = #tpu.dot_dimension_numbers<[1], [0], [0], [1], [0, 0, 1, 1], [], []>} : vector<128x64xbf16>, vector<64x128xbf16>, vector<128x128xf32> -> vector<128x128xf32>
    %56 = arith.addf %48, %55 : vector<128x128xf32>
    %c1_56 = arith.constant 1 : index
    %c0_57 = arith.constant 0 : index
    %c1_58 = arith.constant 1 : index
    %c0_59 = arith.constant 0 : index
    %c0_60 = arith.constant 0 : index
    %57 = vector.load %arg0[%c1_56, %c0_57, %c1_58, %c0_59, %c0_60] : memref<4x2x9x9x64xf32, #tpu.memory_space<vmem>>, vector<1x2x8x8x64xf32>
    %58 = vector.shape_cast %57 : vector<1x2x8x8x64xf32> to vector<2x8x8x64xf32>
    %59 = vector.shape_cast %58 : vector<2x8x8x64xf32> to vector<128x64xf32>
    %60 = arith.truncf %59 : vector<128x64xf32> to vector<128x64xbf16>
    %c7 = arith.constant 7 : index
    %c0_61 = arith.constant 0 : index
    %c0_62 = arith.constant 0 : index
    %61 = vector.load %arg1[%c7, %c0_61, %c0_62] : memref<9x64x128xbf16, #tpu.memory_space<vmem>>, vector<1x64x128xbf16>
    %62 = vector.shape_cast %61 : vector<1x64x128xbf16> to vector<64x128xbf16>
    %cst_63 = arith.constant dense<0.000000e+00> : vector<128x128xf32>
    %63 = tpu.matmul %60, %62, %cst_63 {dimension_numbers = #tpu.dot_dimension_numbers<[1], [0], [0], [1], [0, 0, 1, 1], [], []>} : vector<128x64xbf16>, vector<64x128xbf16>, vector<128x128xf32> -> vector<128x128xf32>
    %64 = arith.addf %56, %63 : vector<128x128xf32>
    %c0_64 = arith.constant 0 : index
    %c0_65 = arith.constant 0 : index
    %c1_66 = arith.constant 1 : index
    %c1_67 = arith.constant 1 : index
    %c0_68 = arith.constant 0 : index
    %65 = vector.load %arg0[%c0_64, %c0_65, %c1_66, %c1_67, %c0_68] : memref<4x2x9x9x64xf32, #tpu.memory_space<vmem>>, vector<1x2x8x8x64xf32>
    %66 = vector.shape_cast %65 : vector<1x2x8x8x64xf32> to vector<2x8x8x64xf32>
    %67 = vector.shape_cast %66 : vector<2x8x8x64xf32> to vector<128x64xf32>
    %68 = arith.truncf %67 : vector<128x64xf32> to vector<128x64xbf16>
    %c8 = arith.constant 8 : index
    %c0_69 = arith.constant 0 : index
    %c0_70 = arith.constant 0 : index
    %69 = vector.load %arg1[%c8, %c0_69, %c0_70] : memref<9x64x128xbf16, #tpu.memory_space<vmem>>, vector<1x64x128xbf16>
    %70 = vector.shape_cast %69 : vector<1x64x128xbf16> to vector<64x128xbf16>
    %cst_71 = arith.constant dense<0.000000e+00> : vector<128x128xf32>
    %71 = tpu.matmul %68, %70, %cst_71 {dimension_numbers = #tpu.dot_dimension_numbers<[1], [0], [0], [1], [0, 0, 1, 1], [], []>} : vector<128x64xbf16>, vector<64x128xbf16>, vector<128x128xf32> -> vector<128x128xf32>
    %72 = arith.addf %64, %71 : vector<128x128xf32>
    %c0_72 = arith.constant 0 : index
    %c0_73 = arith.constant 0 : index
    %73 = vector.load %arg2[%c0_72, %c0_73] : memref<1x128xf32, #tpu.memory_space<vmem>>, vector<1x128xf32>
    %74 = vector.broadcast %73 : vector<1x128xf32> to vector<128x128xf32>
    %75 = arith.addf %72, %74 : vector<128x128xf32>
    %cst_74 = arith.constant 0.000000e+00 : f32
    %76 = vector.broadcast %cst_74 : f32 to vector<128x128xf32>
    %77 = arith.maximumf %75, %76 : vector<128x128xf32>
    %c0_75 = arith.constant 0 : index
    %c0_76 = arith.constant 0 : index
    %78 = vector.load %arg3[%c0_75, %c0_76] : memref<128x128xf32, #tpu.memory_space<vmem>>, vector<128x128xf32>
    tpu.vector_store %arg3[%c0_75, %c0_76], %77 {strides = array<i32>} : memref<128x128xf32, #tpu.memory_space<vmem>>, vector<128x128xf32>,
    return
  }
}

module attributes {stable_mosaic.version = 11 : i64} {
  func.func @_mm_bias_kernel(%arg0: memref<32x1152xbf16, #tpu.memory_space<vmem>>, %arg1: memref<1152x256xbf16, #tpu.memory_space<vmem>>, %arg2: memref<1x256xf32, #tpu.memory_space<vmem>>, %arg3: memref<32x256xf32, #tpu.memory_space<vmem>>) attributes {dimension_semantics = [], scalar_prefetch = 0 : i64, scratch_operands = 0 : i64, tpu.core_type = #tpu.core_type<tc>} {
    %c0 = arith.constant 0 : index
    %c0_0 = arith.constant 0 : index
    %0 = vector.load %arg0[%c0, %c0_0] : memref<32x1152xbf16, #tpu.memory_space<vmem>>, vector<32x1152xbf16>
    %c0_1 = arith.constant 0 : index
    %c0_2 = arith.constant 0 : index
    %1 = vector.load %arg1[%c0_1, %c0_2] : memref<1152x256xbf16, #tpu.memory_space<vmem>>, vector<1152x256xbf16>
    %cst = arith.constant dense<0.000000e+00> : vector<32x256xf32>
    %2 = tpu.matmul %0, %1, %cst {dimension_numbers = #tpu.dot_dimension_numbers<[1], [0], [0], [1], [0, 0, 1, 1], [], []>} : vector<32x1152xbf16>, vector<1152x256xbf16>, vector<32x256xf32> -> vector<32x256xf32>
    %c0_3 = arith.constant 0 : index
    %c0_4 = arith.constant 0 : index
    %3 = vector.load %arg2[%c0_3, %c0_4] : memref<1x256xf32, #tpu.memory_space<vmem>>, vector<1x256xf32>
    %4 = vector.broadcast %3 : vector<1x256xf32> to vector<32x256xf32>
    %5 = arith.addf %2, %4 : vector<32x256xf32>
    %cst_5 = arith.constant 0.000000e+00 : f32
    %6 = vector.broadcast %cst_5 : f32 to vector<32x256xf32>
    %7 = arith.maximumf %5, %6 : vector<32x256xf32>
    %c0_6 = arith.constant 0 : index
    %c0_7 = arith.constant 0 : index
    %8 = vector.load %arg3[%c0_6, %c0_7] : memref<32x256xf32, #tpu.memory_space<vmem>>, vector<32x256xf32>
    tpu.vector_store %arg3[%c0_6, %c0_7], %7 {strides = array<i32>} : memref<32x256xf32, #tpu.memory_space<vmem>>, vector<32x256xf32>,
    return
  }
}

module attributes {stable_mosaic.version = 11 : i64} {
  func.func @_mm_bias_kernel(%arg0: memref<2x4096xbf16, #tpu.memory_space<vmem>>, %arg1: memref<4096x64xbf16, #tpu.memory_space<vmem>>, %arg2: memref<1x64xf32, #tpu.memory_space<vmem>>, %arg3: memref<2x64xf32, #tpu.memory_space<vmem>>) attributes {dimension_semantics = [], scalar_prefetch = 0 : i64, scratch_operands = 0 : i64, tpu.core_type = #tpu.core_type<tc>} {
    %c0 = arith.constant 0 : index
    %c0_0 = arith.constant 0 : index
    %0 = vector.load %arg0[%c0, %c0_0] : memref<2x4096xbf16, #tpu.memory_space<vmem>>, vector<2x4096xbf16>
    %c0_1 = arith.constant 0 : index
    %c0_2 = arith.constant 0 : index
    %1 = vector.load %arg1[%c0_1, %c0_2] : memref<4096x64xbf16, #tpu.memory_space<vmem>>, vector<4096x64xbf16>
    %cst = arith.constant dense<0.000000e+00> : vector<2x64xf32>
    %2 = tpu.matmul %0, %1, %cst {dimension_numbers = #tpu.dot_dimension_numbers<[1], [0], [0], [1], [0, 0, 1, 1], [], []>} : vector<2x4096xbf16>, vector<4096x64xbf16>, vector<2x64xf32> -> vector<2x64xf32>
    %c0_3 = arith.constant 0 : index
    %c0_4 = arith.constant 0 : index
    %3 = vector.load %arg2[%c0_3, %c0_4] : memref<1x64xf32, #tpu.memory_space<vmem>>, vector<1x64xf32>
    %4 = vector.broadcast %3 : vector<1x64xf32> to vector<2x64xf32>
    %5 = arith.addf %2, %4 : vector<2x64xf32>
    %c0_5 = arith.constant 0 : index
    %c0_6 = arith.constant 0 : index
    %6 = vector.load %arg3[%c0_5, %c0_6] : memref<2x64xf32, #tpu.memory_space<vmem>>, vector<2x64xf32>
    tpu.vector_store %arg3[%c0_5, %c0_6], %5 {strides = array<i32>} : memref<2x64xf32, #tpu.memory_space<vmem>>, vector<2x64xf32>,
    return
  }
}

</mosaic_0001>

<llo_original>
// kernel: encoder_forward.5
$region0: #{encoder_forward.5}
  #allocation0 [shape = 'u32[]', space=smem, size = 0x4, offset = 0x4, fixed_abs, tag = 'smem constant byte address 0x4 - core index']
  #allocation1 [shape = 'u32[144,128]{1,0:T(1,128)}', space=vmem, size = 0x12000, scoped, tag = 'internal scratch']
  %s0 = inlined_call_operand.vmem [shape: bf16[2048,36], index: 0, kind: input, shape index: {}]
  %s1 = inlined_call_operand.vmem [shape: bf16[36,32], index: 1, kind: input, shape index: {}]
  %s2 = inlined_call_operand.vmem [shape: f32[1,32], index: 2, kind: input, shape index: {}]
  %s3 = inlined_call_operand.vmem [shape: f32[2048,32], index: 3, kind: output, shape index: {}]
  %s4 = sld [smem:[#allocation0]]
  $region22: #{encoder_forward.5} parent=0
    _
  %s6 = ssub.s32 1, %s4
  %s7 = scalar_select 0, %s6, %s4
  // Predicated region
  $region2: #{encoder_forward.5} parent=0 // pred_check
    _
  $region3: #{encoder_forward.5} parent=0 // pred_check_branch
    %9 = sbr.rel (0) target = $region5
  $region4: #{encoder_forward.5} parent=0 // pred_region
    _
  $region5: #{encoder_forward.5} parent=0 // pred_fallthru
    _
  // Predicated region
  $region6: #{encoder_forward.5} parent=0 // pred_check
    _
  $region7: #{encoder_forward.5} parent=0 // pred_check_branch
    %11 = sbr.rel (0) target = $region9
  $region8: #{encoder_forward.5} parent=0 // pred_region
    _
  $region9: #{encoder_forward.5} parent=0 // pred_fallthru
    _
  // Predicated region
  $region10: #{encoder_forward.5} parent=0 // pred_check
    _
  $region11: #{encoder_forward.5} parent=0 // pred_check_branch
    %13 = sbr.rel (0) target = $region13
  $region12: #{encoder_forward.5} parent=0 // pred_region
    _
  $region13: #{encoder_forward.5} parent=0 // pred_fallthru
    _
  %v15 = vld [vmem:[%s0] sm:$0xf]
  %v16 = vld [vmem:[%s0 + $0x4] sm:$0xf]
  %v17 = vld [vmem:[%s0 + $0x8] sm:$0xf]
  %v18 = vld [vmem:[%s0 + $0xc] sm:$0xf]
  %v19 = vld [vmem:[%s0 + $0x10] sm:$0xf]
  %v20 = vld [vmem:[%s0 + $0x14] sm:$0xf]
  %v21 = vld [vmem:[%s0 + $0x18] sm:$0xf]
  %v22 = vld [vmem:[%s0 + $0x1c] sm:$0xf]
  %v23 = vld [vmem:[%s0 + $0x20] sm:$0xf]
  %v24 = vld [vmem:[%s0 + $0x24] sm:$0xf]
  %v25 = vld [vmem:[%s0 + $0x28] sm:$0xf]
  %v26 = vld [vmem:[%s0 + $0x2c] sm:$0xf]
  %v27 = vld [vmem:[%s0 + $0x30] sm:$0xf]
  %v28 = vld [vmem:[%s0 + $0x34] sm:$0xf]
  %v29 = vld [vmem:[%s0 + $0x38] sm:$0xf]
  %v30 = vld [vmem:[%s0 + $0x3c] sm:$0xf]
  %v31 = vld [vmem:[%s0 + $0x40] sm:$0xf]
  %v32 = vld [vmem:[%s0 + $0x44] sm:$0xf]
  %v33 = vld [vmem:[%s0 + $0x48] sm:$0xf]
  %v34 = vld [vmem:[%s0 + $0x4c] sm:$0xf]
  %v35 = vld [vmem:[%s0 + $0x50] sm:$0xf]
  %v36 = vld [vmem:[%s0 + $0x54] sm:$0xf]
  %v37 = vld [vmem:[%s0 + $0x58] sm:$0xf]
  %v38 = vld [vmem:[%s0 + $0x5c] sm:$0xf]
  %v39 = vld [vmem:[%s0 + $0x60] sm:$0xf]
  %v40 = vld [vmem:[%s0 + $0x64] sm:$0xf]
  %v41 = vld [vmem:[%s0 + $0x68] sm:$0xf]
  %v42 = vld [vmem:[%s0 + $0x6c] sm:$0xf]
  %v43 = vld [vmem:[%s0 + $0x70] sm:$0xf]
  %v44 = vld [vmem:[%s0 + $0x74] sm:$0xf]
  %v45 = vld [vmem:[%s0 + $0x78] sm:$0xf]
  %v46 = vld [vmem:[%s0 + $0x7c] sm:$0xf]
  %v47 = vld [vmem:[%s0 + $0x80] sm:$0xf]
  %v48 = vld [vmem:[%s0 + $0x84] sm:$0xf]
  %v49 = vld [vmem:[%s0 + $0x88] sm:$0xf]
  %v50 = vld [vmem:[%s0 + $0x8c] sm:$0xf]
  %v51 = vld [vmem:[%s0 + $0x90] sm:$0xf]
  %v52 = vld [vmem:[%s0 + $0x94] sm:$0xf]
  %v53 = vld [vmem:[%s0 + $0x98] sm:$0xf]
  %v54 = vld [vmem:[%s0 + $0x9c] sm:$0xf]
  %v55 = vld [vmem:[%s0 + $0xa0] sm:$0xf]
  %v56 = vld [vmem:[%s0 + $0xa4] sm:$0xf]
  %v57 = vld [vmem:[%s0 + $0xa8] sm:$0xf]
  %v58 = vld [vmem:[%s0 + $0xac] sm:$0xf]
  %v59 = vld [vmem:[%s0 + $0xb0] sm:$0xf]
  %v60 = vld [vmem:[%s0 + $0xb4] sm:$0xf]
  %v61 = vld [vmem:[%s0 + $0xb8] sm:$0xf]
  %v62 = vld [vmem:[%s0 + $0xbc] sm:$0xf]
  %v63 = vld [vmem:[%s0 + $0xc0] sm:$0xf]
  %v64 = vld [vmem:[%s0 + $0xc4] sm:$0xf]
  %v65 = vld [vmem:[%s0 + $0xc8] sm:$0xf]
  %v66 = vld [vmem:[%s0 + $0xcc] sm:$0xf]
  %v67 = vld [vmem:[%s0 + $0xd0] sm:$0xf]
  %v68 = vld [vmem:[%s0 + $0xd4] sm:$0xf]
  %v69 = vld [vmem:[%s0 + $0xd8] sm:$0xf]
  %v70 = vld [vmem:[%s0 + $0xdc] sm:$0xf]
  %v71 = vld [vmem:[%s0 + $0xe0] sm:$0xf]
  %v72 = vld [vmem:[%s0 + $0xe4] sm:$0xf]
  %v73 = vld [vmem:[%s0 + $0xe8] sm:$0xf]
  %v74 = vld [vmem:[%s0 + $0xec] sm:$0xf]
  %v75 = vld [vmem:[%s0 + $0xf0] sm:$0xf]
  %v76 = vld [vmem:[%s0 + $0xf4] sm:$0xf]
  %v77 = vld [vmem:[%s0 + $0xf8] sm:$0xf]
  %v78 = vld [vmem:[%s0 + $0xfc] sm:$0xf]
  %v79 = vld [vmem:[%s0 + $0x100] sm:$0xf]
  %v80 = vld [vmem:[%s0 + $0x104] sm:$0xf]
  %v81 = vld [vmem:[%s0 + $0x108] sm:$0xf]
  %v82 = vld [vmem:[%s0 + $0x10c] sm:$0xf]
  %v83 = vld [vmem:[%s0 + $0x110] sm:$0xf]
  %v84 = vld [vmem:[%s0 + $0x114] sm:$0xf]
  %v85 = vld [vmem:[%s0 + $0x118] sm:$0xf]
  %v86 = vld [vmem:[%s0 + $0x11c] sm:$0xf]
  %v87 = vld [vmem:[%s0 + $0x120] sm:$0xf]
  %v88 = vld [vmem:[%s0 + $0x124] sm:$0xf]
  %v89 = vld [vmem:[%s0 + $0x128] sm:$0xf]
  %v90 = vld [vmem:[%s0 + $0x12c] sm:$0xf]
  %v91 = vld [vmem:[%s0 + $0x130] sm:$0xf]
  %v92 = vld [vmem:[%s0 + $0x134] sm:$0xf]
  %v93 = vld [vmem:[%s0 + $0x138] sm:$0xf]
  %v94 = vld [vmem:[%s0 + $0x13c] sm:$0xf]
  %v95 = vld [vmem:[%s0 + $0x140] sm:$0xf]
  %v96 = vld [vmem:[%s0 + $0x144] sm:$0xf]
  %v97 = vld [vmem:[%s0 + $0x148] sm:$0xf]
  %v98 = vld [vmem:[%s0 + $0x14c] sm:$0xf]
  %v99 = vld [vmem:[%s0 + $0x150] sm:$0xf]
  %v100 = vld [vmem:[%s0 + $0x154] sm:$0xf]
  %v101 = vld [vmem:[%s0 + $0x158] sm:$0xf]
  %v102 = vld [vmem:[%s0 + $0x15c] sm:$0xf]
  %v103 = vld [vmem:[%s0 + $0x160] sm:$0xf]
  %v104 = vld [vmem:[%s0 + $0x164] sm:$0xf]
  %v105 = vld [vmem:[%s0 + $0x168] sm:$0xf]
  %v106 = vld [vmem:[%s0 + $0x16c] sm:$0xf]
  %v107 = vld [vmem:[%s0 + $0x170] sm:$0xf]
  %v108 = vld [vmem:[%s0 + $0x174] sm:$0xf]
  %v109 = vld [vmem:[%s0 + $0x178] sm:$0xf]
  %v110 = vld [vmem:[%s0 + $0x17c] sm:$0xf]
  %v111 = vld [vmem:[%s0 + $0x180] sm:$0xf]
  %v112 = vld [vmem:[%s0 + $0x184] sm:$0xf]
  %v113 = vld [vmem:[%s0 + $0x188] sm:$0xf]
  %v114 = vld [vmem:[%s0 + $0x18c] sm:$0xf]
  %v115 = vld [vmem:[%s0 + $0x190] sm:$0xf]
  %v116 = vld [vmem:[%s0 + $0x194] sm:$0xf]
  %v117 = vld [vmem:[%s0 + $0x198] sm:$0xf]
  %v118 = vld [vmem:[%s0 + $0x19c] sm:$0xf]
  %v119 = vld [vmem:[%s0 + $0x1a0] sm:$0xf]
  %v120 = vld [vmem:[%s0 + $0x1a4] sm:$0xf]
  %v121 = vld [vmem:[%s0 + $0x1a8] sm:$0xf]
  %v122 = vld [vmem:[%s0 + $0x1ac] sm:$0xf]
  %v123 = vld [vmem:[%s0 + $0x1b0] sm:$0xf]
  %v124 = vld [vmem:[%s0 + $0x1b4] sm:$0xf]
  %v125 = vld [vmem:[%s0 + $0x1b8] sm:$0xf]
  %v126 = vld [vmem:[%s0 + $0x1bc] sm:$0xf]
  %v127 = vld [vmem:[%s0 + $0x1c0] sm:$0xf]
  %v128 = vld [vmem:[%s0 + $0x1c4] sm:$0xf]
  %v129 = vld [vmem:[%s0 + $0x1c8] sm:$0xf]
  %v130 = vld [vmem:[%s0 + $0x1cc] sm:$0xf]
  %v131 = vld [vmem:[%s0 + $0x1d0] sm:$0xf]
  %v132 = vld [vmem:[%s0 + $0x1d4] sm:$0xf]
  %v133 = vld [vmem:[%s0 + $0x1d8] sm:$0xf]
  %v134 = vld [vmem:[%s0 + $0x1dc] sm:$0xf]
  %v135 = vld [vmem:[%s0 + $0x1e0] sm:$0xf]
  %v136 = vld [vmem:[%s0 + $0x1e4] sm:$0xf]
  %v137 = vld [vmem:[%s0 + $0x1e8] sm:$0xf]
  %v138 = vld [vmem:[%s0 + $0x1ec] sm:$0xf]
  %v139 = vld [vmem:[%s0 + $0x1f0] sm:$0xf]
  %v140 = vld [vmem:[%s0 + $0x1f4] sm:$0xf]
  %v141 = vld [vmem:[%s0 + $0x1f8] sm:$0xf]
  %v142 = vld [vmem:[%s0 + $0x1fc] sm:$0xf]
  %v143 = vld [vmem:[%s0 + $0x200] sm:$0xf]
  %v144 = vld [vmem:[%s0 + $0x204] sm:$0xf]
  %v145 = vld [vmem:[%s0 + $0x208] sm:$0xf]
  %v146 = vld [vmem:[%s0 + $0x20c] sm:$0xf]
  %v147 = vld [vmem:[%s0 + $0x210] sm:$0xf]
  %v148 = vld [vmem:[%s0 + $0x214] sm:$0xf]
  %v149 = vld [vmem:[%s0 + $0x218] sm:$0xf]
  %v150 = vld [vmem:[%s0 + $0x21c] sm:$0xf]
  %v151 = vld [vmem:[%s0 + $0x220] sm:$0xf]
  %v152 = vld [vmem:[%s0 + $0x224] sm:$0xf]
  %v153 = vld [vmem:[%s0 + $0x228] sm:$0xf]
  %v154 = vld [vmem:[%s0 + $0x22c] sm:$0xf]
  %v155 = vld [vmem:[%s0 + $0x230] sm:$0xf]
  %v156 = vld [vmem:[%s0 + $0x234] sm:$0xf]
  %v157 = vld [vmem:[%s0 + $0x238] sm:$0xf]
  %v158 = vld [vmem:[%s0 + $0x23c] sm:$0xf]
  %v159 = vld [vmem:[%s0 + $0x240] sm:$0xf]
  %v160 = vld [vmem:[%s0 + $0x244] sm:$0xf]
  %v161 = vld [vmem:[%s0 + $0x248] sm:$0xf]
  %v162 = vld [vmem:[%s0 + $0x24c] sm:$0xf]
  %v163 = vld [vmem:[%s0 + $0x250] sm:$0xf]
  %v164 = vld [vmem:[%s0 + $0x254] sm:$0xf]
  %v165 = vld [vmem:[%s0 + $0x258] sm:$0xf]
  %v166 = vld [vmem:[%s0 + $0x25c] sm:$0xf]
  %v167 = vld [vmem:[%s0 + $0x260] sm:$0xf]
  %v168 = vld [vmem:[%s0 + $0x264] sm:$0xf]
  %v169 = vld [vmem:[%s0 + $0x268] sm:$0xf]
  %v170 = vld [vmem:[%s0 + $0x26c] sm:$0xf]
  %v171 = vld [vmem:[%s0 + $0x270] sm:$0xf]
  %v172 = vld [vmem:[%s0 + $0x274] sm:$0xf]
  %v173 = vld [vmem:[%s0 + $0x278] sm:$0xf]
  %v174 = vld [vmem:[%s0 + $0x27c] sm:$0xf]
  %v175 = vld [vmem:[%s0 + $0x280] sm:$0xf]
  %v176 = vld [vmem:[%s0 + $0x284] sm:$0xf]
  %v177 = vld [vmem:[%s0 + $0x288] sm:$0xf]
  %v178 = vld [vmem:[%s0 + $0x28c] sm:$0xf]
  %v179 = vld [vmem:[%s0 + $0x290] sm:$0xf]
  %v180 = vld [vmem:[%s0 + $0x294] sm:$0xf]
  %v181 = vld [vmem:[%s0 + $0x298] sm:$0xf]
  %v182 = vld [vmem:[%s0 + $0x29c] sm:$0xf]
  %v183 = vld [vmem:[%s0 + $0x2a0] sm:$0xf]
  %v184 = vld [vmem:[%s0 + $0x2a4] sm:$0xf]
  %v185 = vld [vmem:[%s0 + $0x2a8] sm:$0xf]
  %v186 = vld [vmem:[%s0 + $0x2ac] sm:$0xf]
  %v187 = vld [vmem:[%s0 + $0x2b0] sm:$0xf]
  %v188 = vld [vmem:[%s0 + $0x2b4] sm:$0xf]
  %v189 = vld [vmem:[%s0 + $0x2b8] sm:$0xf]
  %v190 = vld [vmem:[%s0 + $0x2bc] sm:$0xf]
  %v191 = vld [vmem:[%s0 + $0x2c0] sm:$0xf]
  %v192 = vld [vmem:[%s0 + $0x2c4] sm:$0xf]
  %v193 = vld [vmem:[%s0 + $0x2c8] sm:$0xf]
  %v194 = vld [vmem:[%s0 + $0x2cc] sm:$0xf]
  %v195 = vld [vmem:[%s0 + $0x2d0] sm:$0xf]
  %v196 = vld [vmem:[%s0 + $0x2d4] sm:$0xf]
  %v197 = vld [vmem:[%s0 + $0x2d8] sm:$0xf]
  %v198 = vld [vmem:[%s0 + $0x2dc] sm:$0xf]
  %v199 = vld [vmem:[%s0 + $0x2e0] sm:$0xf]
  %v200 = vld [vmem:[%s0 + $0x2e4] sm:$0xf]
  %v201 = vld [vmem:[%s0 + $0x2e8] sm:$0xf]
  %v202 = vld [vmem:[%s0 + $0x2ec] sm:$0xf]
  %v203 = vld [vmem:[%s0 + $0x2f0] sm:$0xf]
  %v204 = vld [vmem:[%s0 + $0x2f4] sm:$0xf]
  %v205 = vld [vmem:[%s0 + $0x2f8] sm:$0xf]
  %v206 = vld [vmem:[%s0 + $0x2fc] sm:$0xf]
  %v207 = vld [vmem:[%s0 + $0x300] sm:$0xf]
  %v208 = vld [vmem:[%s0 + $0x304] sm:$0xf]
  %v209 = vld [vmem:[%s0 + $0x308] sm:$0xf]
  %v210 = vld [vmem:[%s0 + $0x30c] sm:$0xf]
  %v211 = vld [vmem:[%s0 + $0x310] sm:$0xf]
  %v212 = vld [vmem:[%s0 + $0x314] sm:$0xf]
  %v213 = vld [vmem:[%s0 + $0x318] sm:$0xf]
  %v214 = vld [vmem:[%s0 + $0x31c] sm:$0xf]
  %v215 = vld [vmem:[%s0 + $0x320] sm:$0xf]
  %v216 = vld [vmem:[%s0 + $0x324] sm:$0xf]
  %v217 = vld [vmem:[%s0 + $0x328] sm:$0xf]
  %v218 = vld [vmem:[%s0 + $0x32c] sm:$0xf]
  %v219 = vld [vmem:[%s0 + $0x330] sm:$0xf]
  %v220 = vld [vmem:[%s0 + $0x334] sm:$0xf]
  %v221 = vld [vmem:[%s0 + $0x338] sm:$0xf]
  %v222 = vld [vmem:[%s0 + $0x33c] sm:$0xf]
  %v223 = vld [vmem:[%s0 + $0x340] sm:$0xf]
  %v224 = vld [vmem:[%s0 + $0x344] sm:$0xf]
  %v225 = vld [vmem:[%s0 + $0x348] sm:$0xf]
  %v226 = vld [vmem:[%s0 + $0x34c] sm:$0xf]
  %v227 = vld [vmem:[%s0 + $0x350] sm:$0xf]
  %v228 = vld [vmem:[%s0 + $0x354] sm:$0xf]
  %v229 = vld [vmem:[%s0 + $0x358] sm:$0xf]
  %v230 = vld [vmem:[%s0 + $0x35c] sm:$0xf]
  %v231 = vld [vmem:[%s0 + $0x360] sm:$0xf]
  %v232 = vld [vmem:[%s0 + $0x364] sm:$0xf]
  %v233 = vld [vmem:[%s0 + $0x368] sm:$0xf]
  %v234 = vld [vmem:[%s0 + $0x36c] sm:$0xf]
  %v235 = vld [vmem:[%s0 + $0x370] sm:$0xf]
  %v236 = vld [vmem:[%s0 + $0x374] sm:$0xf]
  %v237 = vld [vmem:[%s0 + $0x378] sm:$0xf]
  %v238 = vld [vmem:[%s0 + $0x37c] sm:$0xf]
  %v239 = vld [vmem:[%s0 + $0x380] sm:$0xf]
  %v240 = vld [vmem:[%s0 + $0x384] sm:$0xf]
  %v241 = vld [vmem:[%s0 + $0x388] sm:$0xf]
  %v242 = vld [vmem:[%s0 + $0x38c] sm:$0xf]
  %v243 = vld [vmem:[%s0 + $0x390] sm:$0xf]
  %v244 = vld [vmem:[%s0 + $0x394] sm:$0xf]
  %v245 = vld [vmem:[%s0 + $0x398] sm:$0xf]
  %v246 = vld [vmem:[%s0 + $0x39c] sm:$0xf]
  %v247 = vld [vmem:[%s0 + $0x3a0] sm:$0xf]
  %v248 = vld [vmem:[%s0 + $0x3a4] sm:$0xf]
  %v249 = vld [vmem:[%s0 + $0x3a8] sm:$0xf]
  %v250 = vld [vmem:[%s0 + $0x3ac] sm:$0xf]
  %v251 = vld [vmem:[%s0 + $0x3b0] sm:$0xf]
  %v252 = vld [vmem:[%s0 + $0x3b4] sm:$0xf]
  %v253 = vld [vmem:[%s0 + $0x3b8] sm:$0xf]
  %v254 = vld [vmem:[%s0 + $0x3bc] sm:$0xf]
  %v255 = vld [vmem:[%s0 + $0x3c0] sm:$0xf]
  %v256 = vld [vmem:[%s0 + $0x3c4] sm:$0xf]
  %v257 = vld [vmem:[%s0 + $0x3c8] sm:$0xf]
  %v258 = vld [vmem:[%s0 + $0x3cc] sm:$0xf]
  %v259 = vld [vmem:[%s0 + $0x3d0] sm:$0xf]
  %v260 = vld [vmem:[%s0 + $0x3d4] sm:$0xf]
  %v261 = vld [vmem:[%s0 + $0x3d8] sm:$0xf]
  %v262 = vld [vmem:[%s0 + $0x3dc] sm:$0xf]
  %v263 = vld [vmem:[%s0 + $0x3e0] sm:$0xf]
  %v264 = vld [vmem:[%s0 + $0x3e4] sm:$0xf]
  %v265 = vld [vmem:[%s0 + $0x3e8] sm:$0xf]
  %v266 = vld [vmem:[%s0 + $0x3ec] sm:$0xf]
  %v267 = vld [vmem:[%s0 + $0x3f0] sm:$0xf]
  %v268 = vld [vmem:[%s0 + $0x3f4] sm:$0xf]
  %v269 = vld [vmem:[%s0 + $0x3f8] sm:$0xf]
  %v270 = vld [vmem:[%s0 + $0x3fc] sm:$0xf]
  %v271 = vld [vmem:[%s1] sm:$0xf]
  %v272 = vld [vmem:[%s1 + $0x4] sm:$0xf]
  %v273 = vld [vmem:[%s1 + $0x8] sm:$0xf]
  %v274 = vld [vmem:[%s1 + $0xc] sm:$0xf]
  %v275 = vld [vmem:[%s1 + $0x10] sm:$0x3]
  %v276 = vld [vmem:[%s2] sm:$0x1]
  %v278 = vlaneseq
  %v279 = vshrl.u32 %v278, 7
  %v280 = vsub.s32 0, %v279
  %v281 = vrot.slane %v276, %v280
  %v539 = vunpack.c.l.b16 %v15
  %v540 = vunpack.c.l.b16 %v16
  %v541 = vunpack.c.l.b16 %v17
  %v542 = vunpack.c.l.b16 %v18
  %v543 = vunpack.c.l.b16 %v19
  %v544 = vunpack.c.l.b16 %v20
  %v545 = vunpack.c.l.b16 %v21
  %v546 = vunpack.c.l.b16 %v22
  %v547 = vunpack.c.l.b16 %v23
  %v548 = vunpack.c.l.b16 %v24
  %v549 = vunpack.c.l.b16 %v25
  %v550 = vunpack.c.l.b16 %v26
  %v551 = vunpack.c.l.b16 %v27
  %v552 = vunpack.c.l.b16 %v28
  %v553 = vunpack.c.l.b16 %v29
  %v554 = vunpack.c.l.b16 %v30
  %v555 = vunpack.c.l.b16 %v31
  %v556 = vunpack.c.l.b16 %v32
  %v557 = vunpack.c.l.b16 %v33
  %v558 = vunpack.c.l.b16 %v34
  %v559 = vunpack.c.l.b16 %v35
  %v560 = vunpack.c.l.b16 %v36
  %v561 = vunpack.c.l.b16 %v37
  %v562 = vunpack.c.l.b16 %v38
  %v563 = vunpack.c.l.b16 %v39
  %v564 = vunpack.c.l.b16 %v40
  %v565 = vunpack.c.l.b16 %v41
  %v566 = vunpack.c.l.b16 %v42
  %v567 = vunpack.c.l.b16 %v43
  %v568 = vunpack.c.l.b16 %v44
  %v569 = vunpack.c.l.b16 %v45
  %v570 = vunpack.c.l.b16 %v46
  %v571 = vunpack.c.l.b16 %v47
  %v572 = vunpack.c.l.b16 %v48
  %v573 = vunpack.c.l.b16 %v49
  %v574 = vunpack.c.l.b16 %v50
  %v575 = vunpack.c.l.b16 %v51
  %v576 = vunpack.c.l.b16 %v52
  %v577 = vunpack.c.l.b16 %v53
  %v578 = vunpack.c.l.b16 %v54
  %v579 = vunpack.c.l.b16 %v55
  %v580 = vunpack.c.l.b16 %v56
  %v581 = vunpack.c.l.b16 %v57
  %v582 = vunpack.c.l.b16 %v58
  %v583 = vunpack.c.l.b16 %v59
  %v584 = vunpack.c.l.b16 %v60
  %v585 = vunpack.c.l.b16 %v61
  %v586 = vunpack.c.l.b16 %v62
  %v587 = vunpack.c.l.b16 %v63
  %v588 = vunpack.c.l.b16 %v64
  %v589 = vunpack.c.l.b16 %v65
  %v590 = vunpack.c.l.b16 %v66
  %v591 = vunpack.c.l.b16 %v67
  %v592 = vunpack.c.l.b16 %v68
  %v593 = vunpack.c.l.b16 %v69
  %v594 = vunpack.c.l.b16 %v70
  %v595 = vunpack.c.l.b16 %v71
  %v596 = vunpack.c.l.b16 %v72
  %v597 = vunpack.c.l.b16 %v73
  %v598 = vunpack.c.l.b16 %v74
  %v599 = vunpack.c.l.b16 %v75
  %v600 = vunpack.c.l.b16 %v76
  %v601 = vunpack.c.l.b16 %v77
  %v602 = vunpack.c.l.b16 %v78
  %v603 = vunpack.c.l.b16 %v79
  %v604 = vunpack.c.l.b16 %v80
  %v605 = vunpack.c.l.b16 %v81
  %v606 = vunpack.c.l.b16 %v82
  %v607 = vunpack.c.l.b16 %v83
  %v608 = vunpack.c.l.b16 %v84
  %v609 = vunpack.c.l.b16 %v85
  %v610 = vunpack.c.l.b16 %v86
  %v611 = vunpack.c.l.b16 %v87
  %v612 = vunpack.c.l.b16 %v88
  %v613 = vunpack.c.l.b16 %v89
  %v614 = vunpack.c.l.b16 %v90
  %v615 = vunpack.c.l.b16 %v91
  %v616 = vunpack.c.l.b16 %v92
  %v617 = vunpack.c.l.b16 %v93
  %v618 = vunpack.c.l.b16 %v94
  %v619 = vunpack.c.l.b16 %v95
  %v620 = vunpack.c.l.b16 %v96
  %v621 = vunpack.c.l.b16 %v97
  %v622 = vunpack.c.l.b16 %v98
  %v623 = vunpack.c.l.b16 %v99
  %v624 = vunpack.c.l.b16 %v100
  %v625 = vunpack.c.l.b16 %v101
  %v626 = vunpack.c.l.b16 %v102
  %v627 = vunpack.c.l.b16 %v103
  %v628 = vunpack.c.l.b16 %v104
  %v629 = vunpack.c.l.b16 %v105
  %v630 = vunpack.c.l.b16 %v106
  %v631 = vunpack.c.l.b16 %v107
  %v632 = vunpack.c.l.b16 %v108
  %v633 = vunpack.c.l.b16 %v109
  %v634 = vunpack.c.l.b16 %v110
  %v635 = vunpack.c.l.b16 %v111
  %v636 = vunpack.c.l.b16 %v112
  %v637 = vunpack.c.l.b16 %v113
  %v638 = vunpack.c.l.b16 %v114
  %v639 = vunpack.c.l.b16 %v115
  %v640 = vunpack.c.l.b16 %v116
  %v641 = vunpack.c.l.b16 %v117
  %v642 = vunpack.c.l.b16 %v118
  %v643 = vunpack.c.l.b16 %v119
  %v644 = vunpack.c.l.b16 %v120
  %v645 = vunpack.c.l.b16 %v121
  %v646 = vunpack.c.l.b16 %v122
  %v647 = vunpack.c.l.b16 %v123
  %v648 = vunpack.c.l.b16 %v124
  %v649 = vunpack.c.l.b16 %v125
  %v650 = vunpack.c.l.b16 %v126
  %v651 = vunpack.c.l.b16 %v127
  %v652 = vunpack.c.l.b16 %v128
  %v653 = vunpack.c.l.b16 %v129
  %v654 = vunpack.c.l.b16 %v130
  %v655 = vunpack.c.l.b16 %v131
  %v656 = vunpack.c.l.b16 %v132
  %v657 = vunpack.c.l.b16 %v133
  %v658 = vunpack.c.l.b16 %v134
  %v659 = vunpack.c.l.b16 %v135
  %v660 = vunpack.c.l.b16 %v136
  %v661 = vunpack.c.l.b16 %v137
  %v662 = vunpack.c.l.b16 %v138
  %v663 = vunpack.c.l.b16 %v139
  %v664 = vunpack.c.l.b16 %v140
  %v665 = vunpack.c.l.b16 %v141
  %v666 = vunpack.c.l.b16 %v142
  %v667 = vunpack.c.l.b16 %v143
  %v668 = vunpack.c.l.b16 %v144
  %v669 = vunpack.c.l.b16 %v145
  %v670 = vunpack.c.l.b16 %v146
  %v671 = vunpack.c.l.b16 %v147
  %v672 = vunpack.c.l.b16 %v148
  %v673 = vunpack.c.l.b16 %v149
  %v674 = vunpack.c.l.b16 %v150
  %v675 = vunpack.c.l.b16 %v151
  %v676 = vunpack.c.l.b16 %v152
  %v677 = vunpack.c.l.b16 %v153
  %v678 = vunpack.c.l.b16 %v154
  %v679 = vunpack.c.l.b16 %v155
  %v680 = vunpack.c.l.b16 %v156
  %v681 = vunpack.c.l.b16 %v157
  %v682 = vunpack.c.l.b16 %v158
  %v683 = vunpack.c.l.b16 %v159
  %v684 = vunpack.c.l.b16 %v160
  %v685 = vunpack.c.l.b16 %v161
  %v686 = vunpack.c.l.b16 %v162
  %v687 = vunpack.c.l.b16 %v163
  %v688 = vunpack.c.l.b16 %v164
  %v689 = vunpack.c.l.b16 %v165
  %v690 = vunpack.c.l.b16 %v166
  %v691 = vunpack.c.l.b16 %v167
  %v692 = vunpack.c.l.b16 %v168
  %v693 = vunpack.c.l.b16 %v169
  %v694 = vunpack.c.l.b16 %v170
  %v695 = vunpack.c.l.b16 %v171
  %v696 = vunpack.c.l.b16 %v172
  %v697 = vunpack.c.l.b16 %v173
  %v698 = vunpack.c.l.b16 %v174
  %v699 = vunpack.c.l.b16 %v175
  %v700 = vunpack.c.l.b16 %v176
  %v701 = vunpack.c.l.b16 %v177
  %v702 = vunpack.c.l.b16 %v178
  %v703 = vunpack.c.l.b16 %v179
  %v704 = vunpack.c.l.b16 %v180
  %v705 = vunpack.c.l.b16 %v181
  %v706 = vunpack.c.l.b16 %v182
  %v707 = vunpack.c.l.b16 %v183
  %v708 = vunpack.c.l.b16 %v184
  %v709 = vunpack.c.l.b16 %v185
  %v710 = vunpack.c.l.b16 %v186
  %v711 = vunpack.c.l.b16 %v187
  %v712 = vunpack.c.l.b16 %v188
  %v713 = vunpack.c.l.b16 %v189
  %v714 = vunpack.c.l.b16 %v190
  %v715 = vunpack.c.l.b16 %v191
  %v716 = vunpack.c.l.b16 %v192
  %v717 = vunpack.c.l.b16 %v193
  %v718 = vunpack.c.l.b16 %v194
  %v719 = vunpack.c.l.b16 %v195
  %v720 = vunpack.c.l.b16 %v196
  %v721 = vunpack.c.l.b16 %v197
  %v722 = vunpack.c.l.b16 %v198
  %v723 = vunpack.c.l.b16 %v199
  %v724 = vunpack.c.l.b16 %v200
  %v725 = vunpack.c.l.b16 %v201
  %v726 = vunpack.c.l.b16 %v202
  %v727 = vunpack.c.l.b16 %v203
  %v728 = vunpack.c.l.b16 %v204
  %v729 = vunpack.c.l.b16 %v205
  %v730 = vunpack.c.l.b16 %v206
  %v731 = vunpack.c.l.b16 %v207
  %v732 = vunpack.c.l.b16 %v208
  %v733 = vunpack.c.l.b16 %v209
  %v734 = vunpack.c.l.b16 %v210
  %v735 = vunpack.c.l.b16 %v211
  %v736 = vunpack.c.l.b16 %v212
  %v737 = vunpack.c.l.b16 %v213
  %v738 = vunpack.c.l.b16 %v214
  %v739 = vunpack.c.l.b16 %v215
  %v740 = vunpack.c.l.b16 %v216
  %v741 = vunpack.c.l.b16 %v217
  %v742 = vunpack.c.l.b16 %v218
  %v743 = vunpack.c.l.b16 %v219
  %v744 = vunpack.c.l.b16 %v220
  %v745 = vunpack.c.l.b16 %v221
  %v746 = vunpack.c.l.b16 %v222
  %v747 = vunpack.c.l.b16 %v223
  %v748 = vunpack.c.l.b16 %v224
  %v749 = vunpack.c.l.b16 %v225
  %v750 = vunpack.c.l.b16 %v226
  %v751 = vunpack.c.l.b16 %v227
  %v752 = vunpack.c.l.b16 %v228
  %v753 = vunpack.c.l.b16 %v229
  %v754 = vunpack.c.l.b16 %v230
  %v755 = vunpack.c.l.b16 %v231
  %v756 = vunpack.c.l.b16 %v232
  %v757 = vunpack.c.l.b16 %v233
  %v758 = vunpack.c.l.b16 %v234
  %v759 = vunpack.c.l.b16 %v235
  %v760 = vunpack.c.l.b16 %v236
  %v761 = vunpack.c.l.b16 %v237
  %v762 = vunpack.c.l.b16 %v238
  %v763 = vunpack.c.l.b16 %v239
  %v764 = vunpack.c.l.b16 %v240
  %v765 = vunpack.c.l.b16 %v241
  %v766 = vunpack.c.l.b16 %v242
  %v767 = vunpack.c.l.b16 %v243
  %v768 = vunpack.c.l.b16 %v244
  %v769 = vunpack.c.l.b16 %v245
  %v770 = vunpack.c.l.b16 %v246
  %v771 = vunpack.c.l.b16 %v247
  %v772 = vunpack.c.l.b16 %v248
  %v773 = vunpack.c.l.b16 %v249
  %v774 = vunpack.c.l.b16 %v250
  %v775 = vunpack.c.l.b16 %v251
  %v776 = vunpack.c.l.b16 %v252
  %v777 = vunpack.c.l.b16 %v253
  %v778 = vunpack.c.l.b16 %v254
  %v779 = vunpack.c.l.b16 %v255
  %v780 = vunpack.c.l.b16 %v256
  %v781 = vunpack.c.l.b16 %v257
  %v782 = vunpack.c.l.b16 %v258
  %v783 = vunpack.c.l.b16 %v259
  %v784 = vunpack.c.l.b16 %v260
  %v785 = vunpack.c.l.b16 %v261
  %v786 = vunpack.c.l.b16 %v262
  %v787 = vunpack.c.l.b16 %v263
  %v788 = vunpack.c.l.b16 %v264
  %v789 = vunpack.c.l.b16 %v265
  %v790 = vunpack.c.l.b16 %v266
  %v791 = vunpack.c.l.b16 %v267
  %v792 = vunpack.c.l.b16 %v268
  %v793 = vunpack.c.l.b16 %v269
  %v794 = vunpack.c.l.b16 %v270
  %v795 = vpack.c.b16 %v540, %v539
  %v796 = vpack.c.b16 %v542, %v541
  %v797 = vpack.c.b16 %v544, %v543
  %v798 = vpack.c.b16 %v546, %v545
  %v799 = vpack.c.b16 %v548, %v547
  %v800 = vpack.c.b16 %v550, %v549
  %v801 = vpack.c.b16 %v552, %v551
  %v802 = vpack.c.b16 %v554, %v553
  %v803 = vpack.c.b16 %v556, %v555
  %v804 = vpack.c.b16 %v558, %v557
  %v805 = vpack.c.b16 %v560, %v559
  %v806 = vpack.c.b16 %v562, %v561
  %v807 = vpack.c.b16 %v564, %v563
  %v808 = vpack.c.b16 %v566, %v565
  %v809 = vpack.c.b16 %v568, %v567
  %v810 = vpack.c.b16 %v570, %v569
  %v811 = vpack.c.b16 %v572, %v571
  %v812 = vpack.c.b16 %v574, %v573
  %v813 = vpack.c.b16 %v576, %v575
  %v814 = vpack.c.b16 %v578, %v577
  %v815 = vpack.c.b16 %v580, %v579
  %v816 = vpack.c.b16 %v582, %v581
  %v817 = vpack.c.b16 %v584, %v583
  %v818 = vpack.c.b16 %v586, %v585
  %v819 = vpack.c.b16 %v588, %v587
  %v820 = vpack.c.b16 %v590, %v589
  %v821 = vpack.c.b16 %v592, %v591
  %v822 = vpack.c.b16 %v594, %v593
  %v823 = vpack.c.b16 %v596, %v595
  %v824 = vpack.c.b16 %v598, %v597
  %v825 = vpack.c.b16 %v600, %v599
  %v826 = vpack.c.b16 %v602, %v601
  %v827 = vpack.c.b16 %v604, %v603
  %v828 = vpack.c.b16 %v606, %v605
  %v829 = vpack.c.b16 %v608, %v607
  %v830 = vpack.c.b16 %v610, %v609
  %v831 = vpack.c.b16 %v612, %v611
  %v832 = vpack.c.b16 %v614, %v613
  %v833 = vpack.c.b16 %v616, %v615
  %v834 = vpack.c.b16 %v618, %v617
  %v835 = vpack.c.b16 %v620, %v619
  %v836 = vpack.c.b16 %v622, %v621
  %v837 = vpack.c.b16 %v624, %v623
  %v838 = vpack.c.b16 %v626, %v625
  %v839 = vpack.c.b16 %v628, %v627
  %v840 = vpack.c.b16 %v630, %v629
  %v841 = vpack.c.b16 %v632, %v631
  %v842 = vpack.c.b16 %v634, %v633
  %v843 = vpack.c.b16 %v636, %v635
  %v844 = vpack.c.b16 %v638, %v637
  %v845 = vpack.c.b16 %v640, %v639
  %v846 = vpack.c.b16 %v642, %v641
  %v847 = vpack.c.b16 %v644, %v643
  %v848 = vpack.c.b16 %v646, %v645
  %v849 = vpack.c.b16 %v648, %v647
  %v850 = vpack.c.b16 %v650, %v649
  %v851 = vpack.c.b16 %v652, %v651
  %v852 = vpack.c.b16 %v654, %v653
  %v853 = vpack.c.b16 %v656, %v655
  %v854 = vpack.c.b16 %v658, %v657
  %v855 = vpack.c.b16 %v660, %v659
  %v856 = vpack.c.b16 %v662, %v661
  %v857 = vpack.c.b16 %v664, %v663
  %v858 = vpack.c.b16 %v666, %v665
  %v859 = vpack.c.b16 %v668, %v667
  %v860 = vpack.c.b16 %v670, %v669
  %v861 = vpack.c.b16 %v672, %v671
  %v862 = vpack.c.b16 %v674, %v673
  %v863 = vpack.c.b16 %v676, %v675
  %v864 = vpack.c.b16 %v678, %v677
  %v865 = vpack.c.b16 %v680, %v679
  %v866 = vpack.c.b16 %v682, %v681
  %v867 = vpack.c.b16 %v684, %v683
  %v868 = vpack.c.b16 %v686, %v685
  %v869 = vpack.c.b16 %v688, %v687
  %v870 = vpack.c.b16 %v690, %v689
  %v871 = vpack.c.b16 %v692, %v691
  %v872 = vpack.c.b16 %v694, %v693
  %v873 = vpack.c.b16 %v696, %v695
  %v874 = vpack.c.b16 %v698, %v697
  %v875 = vpack.c.b16 %v700, %v699
  %v876 = vpack.c.b16 %v702, %v701
  %v877 = vpack.c.b16 %v704, %v703
  %v878 = vpack.c.b16 %v706, %v705
  %v879 = vpack.c.b16 %v708, %v707
  %v880 = vpack.c.b16 %v710, %v709
  %v881 = vpack.c.b16 %v712, %v711
  %v882 = vpack.c.b16 %v714, %v713
  %v883 = vpack.c.b16 %v716, %v715
  %v884 = vpack.c.b16 %v718, %v717
  %v885 = vpack.c.b16 %v720, %v719
  %v886 = vpack.c.b16 %v722, %v721
  %v887 = vpack.c.b16 %v724, %v723
  %v888 = vpack.c.b16 %v726, %v725
  %v889 = vpack.c.b16 %v728, %v727
  %v890 = vpack.c.b16 %v730, %v729
  %v891 = vpack.c.b16 %v732, %v731
  %v892 = vpack.c.b16 %v734, %v733
  %v893 = vpack.c.b16 %v736, %v735
  %v894 = vpack.c.b16 %v738, %v737
  %v895 = vpack.c.b16 %v740, %v739
  %v896 = vpack.c.b16 %v742, %v741
  %v897 = vpack.c.b16 %v744, %v743
  %v898 = vpack.c.b16 %v746, %v745
  %v899 = vpack.c.b16 %v748, %v747
  %v900 = vpack.c.b16 %v750, %v749
  %v901 = vpack.c.b16 %v752, %v751
  %v902 = vpack.c.b16 %v754, %v753
  %v903 = vpack.c.b16 %v756, %v755
  %v904 = vpack.c.b16 %v758, %v757
  %v905 = vpack.c.b16 %v760, %v759
  %v906 = vpack.c.b16 %v762, %v761
  %v907 = vpack.c.b16 %v764, %v763
  %v908 = vpack.c.b16 %v766, %v765
  %v909 = vpack.c.b16 %v768, %v767
  %v910 = vpack.c.b16 %v770, %v769
  %v911 = vpack.c.b16 %v772, %v771
  %v912 = vpack.c.b16 %v774, %v773
  %v913 = vpack.c.b16 %v776, %v775
  %v914 = vpack.c.b16 %v778, %v777
  %v915 = vpack.c.b16 %v780, %v779
  %v916 = vpack.c.b16 %v782, %v781
  %v917 = vpack.c.b16 %v784, %v783
  %v918 = vpack.c.b16 %v786, %v785
  %v919 = vpack.c.b16 %v788, %v787
  %v920 = vpack.c.b16 %v790, %v789
  %v921 = vpack.c.b16 %v792, %v791
  %v922 = vpack.c.b16 %v794, %v793
  %v928 = vunpack.c.l.b16 %v271
  %v929 = vunpack.c.l.b16 %v272
  %v930 = vunpack.c.l.b16 %v273
  %v931 = vunpack.c.l.b16 %v274
  %v932 = vunpack.c.l.b16 %v275
  %v933 = vpack.c.b16 %v929, %v928
  %v934 = vpack.c.b16 %v931, %v930
  %v935 = vpack.c.b16 %v932, %v932
  %vm938 = vcmask 293888
  %v940 = vsel %vm938, %v795, 0
  %v943 = vsel %vm938, %v796, 0
  %v946 = vsel %vm938, %v797, 0
  %v949 = vsel %vm938, %v798, 0
  %v952 = vsel %vm938, %v799, 0
  %v955 = vsel %vm938, %v800, 0
  %v958 = vsel %vm938, %v801, 0
  %v961 = vsel %vm938, %v802, 0
  %v964 = vsel %vm938, %v803, 0
  %v967 = vsel %vm938, %v804, 0
  %v970 = vsel %vm938, %v805, 0
  %v973 = vsel %vm938, %v806, 0
  %v976 = vsel %vm938, %v807, 0
  %v979 = vsel %vm938, %v808, 0
  %v982 = vsel %vm938, %v809, 0
  %v985 = vsel %vm938, %v810, 0
  %v988 = vsel %vm938, %v811, 0
  %v991 = vsel %vm938, %v812, 0
  %v994 = vsel %vm938, %v813, 0
  %v997 = vsel %vm938, %v814, 0
  %v1000 = vsel %vm938, %v815, 0
  %v1003 = vsel %vm938, %v816, 0
  %v1006 = vsel %vm938, %v817, 0
  %v1009 = vsel %vm938, %v818, 0
  %v1012 = vsel %vm938, %v819, 0
  %v1015 = vsel %vm938, %v820, 0
  %v1018 = vsel %vm938, %v821, 0
  %v1021 = vsel %vm938, %v822, 0
  %v1024 = vsel %vm938, %v823, 0
  %v1027 = vsel %vm938, %v824, 0
  %v1030 = vsel %vm938, %v825, 0
  %v1033 = vsel %vm938, %v826, 0
  %v1036 = vsel %vm938, %v827, 0
  %v1039 = vsel %vm938, %v828, 0
  %v1042 = vsel %vm938, %v829, 0
  %v1045 = vsel %vm938, %v830, 0
  %v1048 = vsel %vm938, %v831, 0
  %v1051 = vsel %vm938, %v832, 0
  %v1054 = vsel %vm938, %v833, 0
  %v1057 = vsel %vm938, %v834, 0
  %v1060 = vsel %vm938, %v835, 0
  %v1063 = vsel %vm938, %v836, 0
  %v1066 = vsel %vm938, %v837, 0
  %v1069 = vsel %vm938, %v838, 0
  %v1072 = vsel %vm938, %v839, 0
  %v1075 = vsel %vm938, %v840, 0
  %v1078 = vsel %vm938, %v841, 0
  %v1081 = vsel %vm938, %v842, 0
  %v1084 = vsel %vm938, %v843, 0
  %v1087 = vsel %vm938, %v844, 0
  %v1090 = vsel %vm938, %v845, 0
  %v1093 = vsel %vm938, %v846, 0
  %v1096 = vsel %vm938, %v847, 0
  %v1099 = vsel %vm938, %v848, 0
  %v1102 = vsel %vm938, %v849, 0
  %v1105 = vsel %vm938, %v850, 0
  %v1108 = vsel %vm938, %v851, 0
  %v1111 = vsel %vm938, %v852, 0
  %v1114 = vsel %vm938, %v853, 0
  %v1117 = vsel %vm938, %v854, 0
  %v1120 = vsel %vm938, %v855, 0
  %v1123 = vsel %vm938, %v856, 0
  %v1126 = vsel %vm938, %v857, 0
  %v1129 = vsel %vm938, %v858, 0
  %v1132 = vsel %vm938, %v859, 0
  %v1135 = vsel %vm938, %v860, 0
  %v1138 = vsel %vm938, %v861, 0
  %v1141 = vsel %vm938, %v862, 0
  %v1144 = vsel %vm938, %v863, 0
  %v1147 = vsel %vm938, %v864, 0
  %v1150 = vsel %vm938, %v865, 0
  %v1153 = vsel %vm938, %v866, 0
  %v1156 = vsel %vm938, %v867, 0
  %v1159 = vsel %vm938, %v868, 0
  %v1162 = vsel %vm938, %v869, 0
  %v1165 = vsel %vm938, %v870, 0
  %v1168 = vsel %vm938, %v871, 0
  %v1171 = vsel %vm938, %v872, 0
  %v1174 = vsel %vm938, %v873, 0
  %v1177 = vsel %vm938, %v874, 0
  %v1180 = vsel %vm938, %v875, 0
  %v1183 = vsel %vm938, %v876, 0
  %v1186 = vsel %vm938, %v877, 0
  %v1189 = vsel %vm938, %v878, 0
  %v1192 = vsel %vm938, %v879, 0
  %v1195 = vsel %vm938, %v880, 0
  %v1198 = vsel %vm938, %v881, 0
  %v1201 = vsel %vm938, %v882, 0
  %v1204 = vsel %vm938, %v883, 0
  %v1207 = vsel %vm938, %v884, 0
  %v1210 = vsel %vm938, %v885, 0
  %v1213 = vsel %vm938, %v886, 0
  %v1216 = vsel %vm938, %v887, 0
  %v1219 = vsel %vm938, %v888, 0
  %v1222 = vsel %vm938, %v889, 0
  %v1225 = vsel %vm938, %v890, 0
  %v1228 = vsel %vm938, %v891, 0
  %v1231 = vsel %vm938, %v892, 0
  %v1234 = vsel %vm938, %v893, 0
  %v1237 = vsel %vm938, %v894, 0
  %v1240 = vsel %vm938, %v895, 0
  %v1243 = vsel %vm938, %v896, 0
  %v1246 = vsel %vm938, %v897, 0
  %v1249 = vsel %vm938, %v898, 0
  %v1252 = vsel %vm938, %v899, 0
  %v1255 = vsel %vm938, %v900, 0
  %v1258 = vsel %vm938, %v901, 0
  %v1261 = vsel %vm938, %v902, 0
  %v1264 = vsel %vm938, %v903, 0
  %v1267 = vsel %vm938, %v904, 0
  %v1270 = vsel %vm938, %v905, 0
  %v1273 = vsel %vm938, %v906, 0
  %v1276 = vsel %vm938, %v907, 0
  %v1279 = vsel %vm938, %v908, 0
  %v1282 = vsel %vm938, %v909, 0
  %v1285 = vsel %vm938, %v910, 0
  %v1288 = vsel %vm938, %v911, 0
  %v1291 = vsel %vm938, %v912, 0
  %v1294 = vsel %vm938, %v913, 0
  %v1297 = vsel %vm938, %v914, 0
  %v1300 = vsel %vm938, %v915, 0
  %v1303 = vsel %vm938, %v916, 0
  %v1306 = vsel %vm938, %v917, 0
  %v1309 = vsel %vm938, %v918, 0
  %v1312 = vsel %vm938, %v919, 0
  %v1315 = vsel %vm938, %v920, 0
  %v1318 = vsel %vm938, %v921, 0
  %v1321 = vsel %vm938, %v922, 0
  %vm1323 = vcmask 1041408
  %v1325 = vsel %vm1323, %v935, 0
  %1327 = vmatprep.subr.bf16.mxu0 0
  %1328 = vmatpush1.bf16.msra.mxu0 %v933
  %1329 = vmatprep.subr.bf16.mxu0 0
  %1330 = vmatpush1.bf16.msra.mxu0 %v934
  %1331 = vmatprep.subr.bf16.mxu0 0
  %1332 = vmatpush1.bf16.msra.mxu0 %v1325
  %1333 = vmatprep.subr.bf16.mxu0 0
  %1334 = vmatpush1.bf16.msra.mxu0 0
  %1335 = vmatprep.subr.bf16.mxu0 0
  %1336 = vmatpush1.bf16.msra.mxu0 0
  %1337 = vmatprep.subr.bf16.mxu0 0
  %1338 = vmatpush1.bf16.msra.mxu0 0
  %1339 = vmatprep.subr.bf16.mxu0 0
  %1340 = vmatpush1.bf16.msra.mxu0 0
  %1341 = vmatprep.subr.bf16.mxu0 0
  %1342 = vmatpush1.bf16.msra.mxu0 0
  %1343 = vmatprep.subr.bf16.mxu0 0
  %1344 = vmatpush1.bf16.msra.mxu0 0
  %1345 = vmatprep.subr.bf16.mxu0 0
  %1346 = vmatpush1.bf16.msra.mxu0 0
  %1347 = vmatprep.subr.bf16.mxu0 0
  %1348 = vmatpush1.bf16.msra.mxu0 0
  %1349 = vmatprep.subr.bf16.mxu0 0
  %1350 = vmatpush1.bf16.msra.mxu0 0
  %1351 = vmatprep.subr.bf16.mxu0 0
  %1352 = vmatpush1.bf16.msra.mxu0 0
  %1353 = vmatprep.subr.bf16.mxu0 0
  %1354 = vmatpush1.bf16.msra.mxu0 0
  %1355 = vmatprep.subr.bf16.mxu0 0
  %1356 = vmatpush1.bf16.msra.mxu0 0
  %1357 = vmatprep.subr.bf16.mxu0 0
  %1358 = vmatpush1.bf16.msra.mxu0 0
  %1359 = vmatprep.mubr.bf16.mxu0 0
  %1360 = vmatmul.mubr.bf16.gmra.mrb[0].mxu0 %v940
  %v1361 = vpop.f32.mrb[0].mxu0
  %v1362 = vadd.f32 %v281, %v1361
  %v1363 = vpop.f32.mrb[0].mxu0
  %v1364 = vpop.f32.mrb[0].mxu0
  %v1365 = vadd.f32 %v281, %v1364
  %v1366 = vpop.f32.mrb[0].mxu0
  %1367 = vmatprep.mubr.bf16.mxu0 0
  %1368 = vmatmul.mubr.bf16.gmra.mrb[0].mxu0 %v943
  %v1369 = vpop.f32.mrb[0].mxu0
  %v1370 = vadd.f32 %v281, %v1369
  %v1371 = vpop.f32.mrb[0].mxu0
  %v1372 = vpop.f32.mrb[0].mxu0
  %v1373 = vadd.f32 %v281, %v1372
  %v1374 = vpop.f32.mrb[0].mxu0
  %1375 = vmatprep.mubr.bf16.mxu0 0
  %1376 = vmatmul.mubr.bf16.gmra.mrb[0].mxu0 %v946
  %v1377 = vpop.f32.mrb[0].mxu0
  %v1378 = vadd.f32 %v281, %v1377
  %v1379 = vpop.f32.mrb[0].mxu0
  %v1380 = vpop.f32.mrb[0].mxu0
  %v1381 = vadd.f32 %v281, %v1380
  %v1382 = vpop.f32.mrb[0].mxu0
  %1383 = vmatprep.mubr.bf16.mxu0 0
  %1384 = vmatmul.mubr.bf16.gmra.mrb[0].mxu0 %v949
  %v1385 = vpop.f32.mrb[0].mxu0
  %v1386 = vadd.f32 %v281, %v1385
  %v1387 = vpop.f32.mrb[0].mxu0
  %v1388 = vpop.f32.mrb[0].mxu0
  %v1389 = vadd.f32 %v281, %v1388
  %v1390 = vpop.f32.mrb[0].mxu0
  %1391 = vmatprep.mubr.bf16.mxu0 0
  %1392 = vmatmul.mubr.bf16.gmra.mrb[0].mxu0 %v952
  %v1393 = vpop.f32.mrb[0].mxu0
  %v1394 = vadd.f32 %v281, %v1393
  %v1395 = vpop.f32.mrb[0].mxu0
  %v1396 = vpop.f32.mrb[0].mxu0
  %v1397 = vadd.f32 %v281, %v1396
  %v1398 = vpop.f32.mrb[0].mxu0
  %1399 = vmatprep.mubr.bf16.mxu0 0
  %1400 = vmatmul.mubr.bf16.gmra.mrb[0].mxu0 %v955
  %v1401 = vpop.f32.mrb[0].mxu0
  %v1402 = vadd.f32 %v281, %v1401
  %v1403 = vpop.f32.mrb[0].mxu0
  %v1404 = vpop.f32.mrb[0].mxu0
  %v1405 = vadd.f32 %v281, %v1404
  %v1406 = vpop.f32.mrb[0].mxu0
  %1407 = vmatprep.mubr.bf16.mxu0 0
  %1408 = vmatmul.mubr.bf16.gmra.mrb[0].mxu0 %v958
  %v1409 = vpop.f32.mrb[0].mxu0
  %v1410 = vadd.f32 %v281, %v1409
  %v1411 = vpop.f32.mrb[0].mxu0
  %v1412 = vpop.f32.mrb[0].mxu0
  %v1413 = vadd.f32 %v281, %v1412
  %v1414 = vpop.f32.mrb[0].mxu0
  %1415 = vmatprep.mubr.bf16.mxu0 0
  %1416 = vmatmul.mubr.bf16.gmra.mrb[0].mxu0 %v961
  %v1417 = vpop.f32.mrb[0].mxu0
  %v1418 = vadd.f32 %v281, %v1417
  %v1419 = vpop.f32.mrb[0].mxu0
  %v1420 = vpop.f32.mrb[0].mxu0
  %v1421 = vadd.f32 %v281, %v1420
  %v1422 = vpop.f32.mrb[0].mxu0
  %1423 = vmatprep.mubr.bf16.mxu0 0
  %1424 = vmatmul.mubr.bf16.gmra.mrb[0].mxu0 %v964
  %v1425 = vpop.f32.mrb[0].mxu0
  %v1426 = vadd.f32 %v281, %v1425
  %v1427 = vpop.f32.mrb[0].mxu0
  %v1428 = vpop.f32.mrb[0].mxu0
  %v1429 = vadd.f32 %v281, %v1428
  %v1430 = vpop.f32.mrb[0].mxu0
  %1431 = vmatprep.mubr.bf16.mxu0 0
  %1432 = vmatmul.mubr.bf16.gmra.mrb[0].mxu0 %v967
  %v1433 = vpop.f32.mrb[0].mxu0
  %v1434 = vadd.f32 %v281, %v1433
  %v1435 = vpop.f32.mrb[0].mxu0
  %v1436 = vpop.f32.mrb[0].mxu0
  %v1437 = vadd.f32 %v281, %v1436
  %v1438 = vpop.f32.mrb[0].mxu0
  %1439 = vmatprep.mubr.bf16.mxu0 0
  %1440 = vmatmul.mubr.bf16.gmra.mrb[0].mxu0 %v970
  %v1441 = vpop.f32.mrb[0].mxu0
  %v1442 = vadd.f32 %v281, %v1441
  %v1443 = vpop.f32.mrb[0].mxu0
  %v1444 = vpop.f32.mrb[0].mxu0
  %v1445 = vadd.f32 %v281, %v1444
  %v1446 = vpop.f32.mrb[0].mxu0
  %1447 = vmatprep.mubr.bf16.mxu0 0
  %1448 = vmatmul.mubr.bf16.gmra.mrb[0].mxu0 %v973
  %v1449 = vpop.f32.mrb[0].mxu0
  %v1450 = vadd.f32 %v281, %v1449
  %v1451 = vpop.f32.mrb[0].mxu0
  %v1452 = vpop.f32.mrb[0].mxu0
  %v1453 = vadd.f32 %v281, %v1452
  %v1454 = vpop.f32.mrb[0].mxu0
  %1455 = vmatprep.mubr.bf16.mxu0 0
  %1456 = vmatmul.mubr.bf16.gmra.mrb[0].mxu0 %v976
  %v1457 = vpop.f32.mrb[0].mxu0
  %v1458 = vadd.f32 %v281, %v1457
  %v1459 = vpop.f32.mrb[0].mxu0
  %v1460 = vpop.f32.mrb[0].mxu0
  %v1461 = vadd.f32 %v281, %v1460
  %v1462 = vpop.f32.mrb[0].mxu0
  %1463 = vmatprep.mubr.bf16.mxu0 0
  %1464 = vmatmul.mubr.bf16.gmra.mrb[0].mxu0 %v979
  %v1465 = vpop.f32.mrb[0].mxu0
  %v1466 = vadd.f32 %v281, %v1465
  %v1467 = vpop.f32.mrb[0].mxu0
  %v1468 = vpop.f32.mrb[0].mxu0
  %v1469 = vadd.f32 %v281, %v1468
  %v1470 = vpop.f32.mrb[0].mxu0
  %1471 = vmatprep.mubr.bf16.mxu0 0
  %1472 = vmatmul.mubr.bf16.gmra.mrb[0].mxu0 %v982
  %v1473 = vpop.f32.mrb[0].mxu0
  %v1474 = vadd.f32 %v281, %v1473
  %v1475 = vpop.f32.mrb[0].mxu0
  %v1476 = vpop.f32.mrb[0].mxu0
  %v1477 = vadd.f32 %v281, %v1476
  %v1478 = vpop.f32.mrb[0].mxu0
  %1479 = vmatprep.mubr.bf16.mxu0 0
  %1480 = vmatmul.mubr.bf16.gmra.mrb[0].mxu0 %v985
  %v1481 = vpop.f32.mrb[0].mxu0
  %v1482 = vadd.f32 %v281, %v1481
  %v1483 = vpop.f32.mrb[0].mxu0
  %v1484 = vpop.f32.mrb[0].mxu0
  %v1485 = vadd.f32 %v281, %v1484
  %v1486 = vpop.f32.mrb[0].mxu0
  %1487 = vmatprep.mubr.bf16.mxu0 0
  %1488 = vmatmul.mubr.bf16.gmra.mrb[0].mxu0 %v988
  %v1489 = vpop.f32.mrb[0].mxu0
  %v1490 = vadd.f32 %v281, %v1489
  %v1491 = vpop.f32.mrb[0].mxu0
  %v1492 = vpop.f32.mrb[0].mxu0
  %v1493 = vadd.f32 %v281, %v1492
  %v1494 = vpop.f32.mrb[0].mxu0
  %1495 = vmatprep.mubr.bf16.mxu0 0
  %1496 = vmatmul.mubr.bf16.gmra.mrb[0].mxu0 %v991
  %v1497 = vpop.f32.mrb[0].mxu0
  %v1498 = vadd.f32 %v281, %v1497
  %v1499 = vpop.f32.mrb[0].mxu0
  %v1500 = vpop.f32.mrb[0].mxu0
  %v1501 = vadd.f32 %v281, %v1500
  %v1502 = vpop.f32.mrb[0].mxu0
  %1503 = vmatprep.mubr.bf16.mxu0 0
  %1504 = vmatmul.mubr.bf16.gmra.mrb[0].mxu0 %v994
  %v1505 = vpop.f32.mrb[0].mxu0
  %v1506 = vadd.f32 %v281, %v1505
  %v1507 = vpop.f32.mrb[0].mxu0
  %v1508 = vpop.f32.mrb[0].mxu0
  %v1509 = vadd.f32 %v281, %v1508
  %v1510 = vpop.f32.mrb[0].mxu0
  %1511 = vmatprep.mubr.bf16.mxu0 0
  %1512 = vmatmul.mubr.bf16.gmra.mrb[0].mxu0 %v997
  %v1513 = vpop.f32.mrb[0].mxu0
  %v1514 = vadd.f32 %v281, %v1513
  %v1515 = vpop.f32.mrb[0].mxu0
  %v1516 = vpop.f32.mrb[0].mxu0
  %v1517 = vadd.f32 %v281, %v1516
  %v1518 = vpop.f32.mrb[0].mxu0
  %1519 = vmatprep.mubr.bf16.mxu0 0
  %1520 = vmatmul.mubr.bf16.gmra.mrb[0].mxu0 %v1000
  %v1521 = vpop.f32.mrb[0].mxu0
  %v1522 = vadd.f32 %v281, %v1521
  %v1523 = vpop.f32.mrb[0].mxu0
  %v1524 = vpop.f32.mrb[0].mxu0
  %v1525 = vadd.f32 %v281, %v1524
  %v1526 = vpop.f32.mrb[0].mxu0
  %1527 = vmatprep.mubr.bf16.mxu0 0
  %1528 = vmatmul.mubr.bf16.gmra.mrb[0].mxu0 %v1003
  %v1529 = vpop.f32.mrb[0].mxu0
  %v1530 = vadd.f32 %v281, %v1529
  %v1531 = vpop.f32.mrb[0].mxu0
  %v1532 = vpop.f32.mrb[0].mxu0
  %v1533 = vadd.f32 %v281, %v1532
  %v1534 = vpop.f32.mrb[0].mxu0
  %1535 = vmatprep.mubr.bf16.mxu0 0
  %1536 = vmatmul.mubr.bf16.gmra.mrb[0].mxu0 %v1006
  %v1537 = vpop.f32.mrb[0].mxu0
  %v1538 = vadd.f32 %v281, %v1537
  %v1539 = vpop.f32.mrb[0].mxu0
  %v1540 = vpop.f32.mrb[0].mxu0
  %v1541 = vadd.f32 %v281, %v1540
  %v1542 = vpop.f32.mrb[0].mxu0
  %1543 = vmatprep.mubr.bf16.mxu0 0
  %1544 = vmatmul.mubr.bf16.gmra.mrb[0].mxu0 %v1009
  %v1545 = vpop.f32.mrb[0].mxu0
  %v1546 = vadd.f32 %v281, %v1545
  %v1547 = vpop.f32.mrb[0].mxu0
  %v1548 = vpop.f32.mrb[0].mxu0
  %v1549 = vadd.f32 %v281, %v1548
  %v1550 = vpop.f32.mrb[0].mxu0
  %1551 = vmatprep.mubr.bf16.mxu0 0
  %1552 = vmatmul.mubr.bf16.gmra.mrb[0].mxu0 %v1012
  %v1553 = vpop.f32.mrb[0].mxu0
  %v1554 = vadd.f32 %v281, %v1553
  %v1555 = vpop.f32.mrb[0].mxu0
  %v1556 = vpop.f32.mrb[0].mxu0
  %v1557 = vadd.f32 %v281, %v1556
  %v1558 = vpop.f32.mrb[0].mxu0
  %1559 = vmatprep.mubr.bf16.mxu0 0
  %1560 = vmatmul.mubr.bf16.gmra.mrb[0].mxu0 %v1015
  %v1561 = vpop.f32.mrb[0].mxu0
  %v1562 = vadd.f32 %v281, %v1561
  %v1563 = vpop.f32.mrb[0].mxu0
  %v1564 = vpop.f32.mrb[0].mxu0
  %v1565 = vadd.f32 %v281, %v1564
  %v1566 = vpop.f32.mrb[0].mxu0
  %1567 = vmatprep.mubr.bf16.mxu0 0
  %1568 = vmatmul.mubr.bf16.gmra.mrb[0].mxu0 %v1018
  %v1569 = vpop.f32.mrb[0].mxu0
  %v1570 = vadd.f32 %v281, %v1569
  %v1571 = vpop.f32.mrb[0].mxu0
  %v1572 = vpop.f32.mrb[0].mxu0
  %v1573 = vadd.f32 %v281, %v1572
  %v1574 = vpop.f32.mrb[0].mxu0
  %1575 = vmatprep.mubr.bf16.mxu0 0
  %1576 = vmatmul.mubr.bf16.gmra.mrb[0].mxu0 %v1021
  %v1577 = vpop.f32.mrb[0].mxu0
  %v1578 = vadd.f32 %v281, %v1577
  %v1579 = vpop.f32.mrb[0].mxu0
  %v1580 = vpop.f32.mrb[0].mxu0
  %v1581 = vadd.f32 %v281, %v1580
  %v1582 = vpop.f32.mrb[0].mxu0
  %1583 = vmatprep.mubr.bf16.mxu0 0
  %1584 = vmatmul.mubr.bf16.gmra.mrb[0].mxu0 %v1024
  %v1585 = vpop.f32.mrb[0].mxu0
  %v1586 = vadd.f32 %v281, %v1585
  %v1587 = vpop.f32.mrb[0].mxu0
  %v1588 = vpop.f32.mrb[0].mxu0
  %v1589 = vadd.f32 %v281, %v1588
  %v1590 = vpop.f32.mrb[0].mxu0
  %1591 = vmatprep.mubr.bf16.mxu0 0
  %1592 = vmatmul.mubr.bf16.gmra.mrb[0].mxu0 %v1027
  %v1593 = vpop.f32.mrb[0].mxu0
  %v1594 = vadd.f32 %v281, %v1593
  %v1595 = vpop.f32.mrb[0].mxu0
  %v1596 = vpop.f32.mrb[0].mxu0
  %v1597 = vadd.f32 %v281, %v1596
  %v1598 = vpop.f32.mrb[0].mxu0
  %1599 = vmatprep.mubr.bf16.mxu0 0
  %1600 = vmatmul.mubr.bf16.gmra.mrb[0].mxu0 %v1030
  %v1601 = vpop.f32.mrb[0].mxu0
  %v1602 = vadd.f32 %v281, %v1601
  %v1603 = vpop.f32.mrb[0].mxu0
  %v1604 = vpop.f32.mrb[0].mxu0
  %v1605 = vadd.f32 %v281, %v1604
  %v1606 = vpop.f32.mrb[0].mxu0
  %1607 = vmatprep.mubr.bf16.mxu0 0
  %1608 = vmatmul.mubr.bf16.gmra.mrb[0].mxu0 %v1033
  %v1609 = vpop.f32.mrb[0].mxu0
  %v1610 = vadd.f32 %v281, %v1609
  %v1611 = vpop.f32.mrb[0].mxu0
  %v1612 = vpop.f32.mrb[0].mxu0
  %v1613 = vadd.f32 %v281, %v1612
  %v1614 = vpop.f32.mrb[0].mxu0
  %1615 = vmatprep.mubr.bf16.mxu0 0
  %1616 = vmatmul.mubr.bf16.gmra.mrb[0].mxu0 %v1036
  %v1617 = vpop.f32.mrb[0].mxu0
  %v1618 = vadd.f32 %v281, %v1617
  %v1619 = vpop.f32.mrb[0].mxu0
  %v1620 = vpop.f32.mrb[0].mxu0
  %v1621 = vadd.f32 %v281, %v1620
  %v1622 = vpop.f32.mrb[0].mxu0
  %1623 = vmatprep.mubr.bf16.mxu0 0
  %1624 = vmatmul.mubr.bf16.gmra.mrb[0].mxu0 %v1039
  %v1625 = vpop.f32.mrb[0].mxu0
  %v1626 = vadd.f32 %v281, %v1625
  %v1627 = vpop.f32.mrb[0].mxu0
  %v1628 = vpop.f32.mrb[0].mxu0
  %v1629 = vadd.f32 %v281, %v1628
  %v1630 = vpop.f32.mrb[0].mxu0
  %1631 = vmatprep.mubr.bf16.mxu0 0
  %1632 = vmatmul.mubr.bf16.gmra.mrb[0].mxu0 %v1042
  %v1633 = vpop.f32.mrb[0].mxu0
  %v1634 = vadd.f32 %v281, %v1633
  %v1635 = vpop.f32.mrb[0].mxu0
  %v1636 = vpop.f32.mrb[0].mxu0
  %v1637 = vadd.f32 %v281, %v1636
  %v1638 = vpop.f32.mrb[0].mxu0
  %1639 = vmatprep.mubr.bf16.mxu0 0
  %1640 = vmatmul.mubr.bf16.gmra.mrb[0].mxu0 %v1045
  %v1641 = vpop.f32.mrb[0].mxu0
  %v1642 = vadd.f32 %v281, %v1641
  %v1643 = vpop.f32.mrb[0].mxu0
  %v1644 = vpop.f32.mrb[0].mxu0
  %v1645 = vadd.f32 %v281, %v1644
  %v1646 = vpop.f32.mrb[0].mxu0
  %1647 = vmatprep.mubr.bf16.mxu0 0
  %1648 = vmatmul.mubr.bf16.gmra.mrb[0].mxu0 %v1048
  %v1649 = vpop.f32.mrb[0].mxu0
  %v1650 = vadd.f32 %v281, %v1649
  %v1651 = vpop.f32.mrb[0].mxu0
  %v1652 = vpop.f32.mrb[0].mxu0
  %v1653 = vadd.f32 %v281, %v1652
  %v1654 = vpop.f32.mrb[0].mxu0
  %1655 = vmatprep.mubr.bf16.mxu0 0
  %1656 = vmatmul.mubr.bf16.gmra.mrb[0].mxu0 %v1051
  %v1657 = vpop.f32.mrb[0].mxu0
  %v1658 = vadd.f32 %v281, %v1657
  %v1659 = vpop.f32.mrb[0].mxu0
  %v1660 = vpop.f32.mrb[0].mxu0
  %v1661 = vadd.f32 %v281, %v1660
  %v1662 = vpop.f32.mrb[0].mxu0
  %1663 = vmatprep.mubr.bf16.mxu0 0
  %1664 = vmatmul.mubr.bf16.gmra.mrb[0].mxu0 %v1054
  %v1665 = vpop.f32.mrb[0].mxu0
  %v1666 = vadd.f32 %v281, %v1665
  %v1667 = vpop.f32.mrb[0].mxu0
  %v1668 = vpop.f32.mrb[0].mxu0
  %v1669 = vadd.f32 %v281, %v1668
  %v1670 = vpop.f32.mrb[0].mxu0
  %1671 = vmatprep.mubr.bf16.mxu0 0
  %1672 = vmatmul.mubr.bf16.gmra.mrb[0].mxu0 %v1057
  %v1673 = vpop.f32.mrb[0].mxu0
  %v1674 = vadd.f32 %v281, %v1673
  %v1675 = vpop.f32.mrb[0].mxu0
  %v1676 = vpop.f32.mrb[0].mxu0
  %v1677 = vadd.f32 %v281, %v1676
  %v1678 = vpop.f32.mrb[0].mxu0
  %1679 = vmatprep.mubr.bf16.mxu0 0
  %1680 = vmatmul.mubr.bf16.gmra.mrb[0].mxu0 %v1060
  %v1681 = vpop.f32.mrb[0].mxu0
  %v1682 = vadd.f32 %v281, %v1681
  %v1683 = vpop.f32.mrb[0].mxu0
  %v1684 = vpop.f32.mrb[0].mxu0
  %v1685 = vadd.f32 %v281, %v1684
  %v1686 = vpop.f32.mrb[0].mxu0
  %1687 = vmatprep.mubr.bf16.mxu0 0
  %1688 = vmatmul.mubr.bf16.gmra.mrb[0].mxu0 %v1063
  %v1689 = vpop.f32.mrb[0].mxu0
  %v1690 = vadd.f32 %v281, %v1689
  %v1691 = vpop.f32.mrb[0].mxu0
  %v1692 = vpop.f32.mrb[0].mxu0
  %v1693 = vadd.f32 %v281, %v1692
  %v1694 = vpop.f32.mrb[0].mxu0
  %1695 = vmatprep.mubr.bf16.mxu0 0
  %1696 = vmatmul.mubr.bf16.gmra.mrb[0].mxu0 %v1066
  %v1697 = vpop.f32.mrb[0].mxu0
  %v1698 = vadd.f32 %v281, %v1697
  %v1699 = vpop.f32.mrb[0].mxu0
  %v1700 = vpop.f32.mrb[0].mxu0
  %v1701 = vadd.f32 %v281, %v1700
  %v1702 = vpop.f32.mrb[0].mxu0
  %1703 = vmatprep.mubr.bf16.mxu0 0
  %1704 = vmatmul.mubr.bf16.gmra.mrb[0].mxu0 %v1069
  %v1705 = vpop.f32.mrb[0].mxu0
  %v1706 = vadd.f32 %v281, %v1705
  %v1707 = vpop.f32.mrb[0].mxu0
  %v1708 = vpop.f32.mrb[0].mxu0
  %v1709 = vadd.f32 %v281, %v1708
  %v1710 = vpop.f32.mrb[0].mxu0
  %1711 = vmatprep.mubr.bf16.mxu0 0
  %1712 = vmatmul.mubr.bf16.gmra.mrb[0].mxu0 %v1072
  %v1713 = vpop.f32.mrb[0].mxu0
  %v1714 = vadd.f32 %v281, %v1713
  %v1715 = vpop.f32.mrb[0].mxu0
  %v1716 = vpop.f32.mrb[0].mxu0
  %v1717 = vadd.f32 %v281, %v1716
  %v1718 = vpop.f32.mrb[0].mxu0
  %1719 = vmatprep.mubr.bf16.mxu0 0
  %1720 = vmatmul.mubr.bf16.gmra.mrb[0].mxu0 %v1075
  %v1721 = vpop.f32.mrb[0].mxu0
  %v1722 = vadd.f32 %v281, %v1721
  %v1723 = vpop.f32.mrb[0].mxu0
  %v1724 = vpop.f32.mrb[0].mxu0
  %v1725 = vadd.f32 %v281, %v1724
  %v1726 = vpop.f32.mrb[0].mxu0
  %1727 = vmatprep.mubr.bf16.mxu0 0
  %1728 = vmatmul.mubr.bf16.gmra.mrb[0].mxu0 %v1078
  %v1729 = vpop.f32.mrb[0].mxu0
  %v1730 = vadd.f32 %v281, %v1729
  %v1731 = vpop.f32.mrb[0].mxu0
  %v1732 = vpop.f32.mrb[0].mxu0
  %v1733 = vadd.f32 %v281, %v1732
  %v1734 = vpop.f32.mrb[0].mxu0
  %1735 = vmatprep.mubr.bf16.mxu0 0
  %1736 = vmatmul.mubr.bf16.gmra.mrb[0].mxu0 %v1081
  %v1737 = vpop.f32.mrb[0].mxu0
  %v1738 = vadd.f32 %v281, %v1737
  %v1739 = vpop.f32.mrb[0].mxu0
  %v1740 = vpop.f32.mrb[0].mxu0
  %v1741 = vadd.f32 %v281, %v1740
  %v1742 = vpop.f32.mrb[0].mxu0
  %1743 = vmatprep.mubr.bf16.mxu0 0
  %1744 = vmatmul.mubr.bf16.gmra.mrb[0].mxu0 %v1084
  %v1745 = vpop.f32.mrb[0].mxu0
  %v1746 = vadd.f32 %v281, %v1745
  %v1747 = vpop.f32.mrb[0].mxu0
  %v1748 = vpop.f32.mrb[0].mxu0
  %v1749 = vadd.f32 %v281, %v1748
  %v1750 = vpop.f32.mrb[0].mxu0
  %1751 = vmatprep.mubr.bf16.mxu0 0
  %1752 = vmatmul.mubr.bf16.gmra.mrb[0].mxu0 %v1087
  %v1753 = vpop.f32.mrb[0].mxu0
  %v1754 = vadd.f32 %v281, %v1753
  %v1755 = vpop.f32.mrb[0].mxu0
  %v1756 = vpop.f32.mrb[0].mxu0
  %v1757 = vadd.f32 %v281, %v1756
  %v1758 = vpop.f32.mrb[0].mxu0
  %1759 = vmatprep.mubr.bf16.mxu0 0
  %1760 = vmatmul.mubr.bf16.gmra.mrb[0].mxu0 %v1090
  %v1761 = vpop.f32.mrb[0].mxu0
  %v1762 = vadd.f32 %v281, %v1761
  %v1763 = vpop.f32.mrb[0].mxu0
  %v1764 = vpop.f32.mrb[0].mxu0
  %v1765 = vadd.f32 %v281, %v1764
  %v1766 = vpop.f32.mrb[0].mxu0
  %1767 = vmatprep.mubr.bf16.mxu0 0
  %1768 = vmatmul.mubr.bf16.gmra.mrb[0].mxu0 %v1093
  %v1769 = vpop.f32.mrb[0].mxu0
  %v1770 = vadd.f32 %v281, %v1769
  %v1771 = vpop.f32.mrb[0].mxu0
  %v1772 = vpop.f32.mrb[0].mxu0
  %v1773 = vadd.f32 %v281, %v1772
  %v1774 = vpop.f32.mrb[0].mxu0
  %1775 = vmatprep.mubr.bf16.mxu0 0
  %1776 = vmatmul.mubr.bf16.gmra.mrb[0].mxu0 %v1096
  %v1777 = vpop.f32.mrb[0].mxu0
  %v1778 = vadd.f32 %v281, %v1777
  %v1779 = vpop.f32.mrb[0].mxu0
  %v1780 = vpop.f32.mrb[0].mxu0
  %v1781 = vadd.f32 %v281, %v1780
  %v1782 = vpop.f32.mrb[0].mxu0
  %1783 = vmatprep.mubr.bf16.mxu0 0
  %1784 = vmatmul.mubr.bf16.gmra.mrb[0].mxu0 %v1099
  %v1785 = vpop.f32.mrb[0].mxu0
  %v1786 = vadd.f32 %v281, %v1785
  %v1787 = vpop.f32.mrb[0].mxu0
  %v1788 = vpop.f32.mrb[0].mxu0
  %v1789 = vadd.f32 %v281, %v1788
  %v1790 = vpop.f32.mrb[0].mxu0
  %1791 = vmatprep.mubr.bf16.mxu0 0
  %1792 = vmatmul.mubr.bf16.gmra.mrb[0].mxu0 %v1102
  %v1793 = vpop.f32.mrb[0].mxu0
  %v1794 = vadd.f32 %v281, %v1793
  %v1795 = vpop.f32.mrb[0].mxu0
  %v1796 = vpop.f32.mrb[0].mxu0
  %v1797 = vadd.f32 %v281, %v1796
  %v1798 = vpop.f32.mrb[0].mxu0
  %1799 = vmatprep.mubr.bf16.mxu0 0
  %1800 = vmatmul.mubr.bf16.gmra.mrb[0].mxu0 %v1105
  %v1801 = vpop.f32.mrb[0].mxu0
  %v1802 = vadd.f32 %v281, %v1801
  %v1803 = vpop.f32.mrb[0].mxu0
  %v1804 = vpop.f32.mrb[0].mxu0
  %v1805 = vadd.f32 %v281, %v1804
  %v1806 = vpop.f32.mrb[0].mxu0
  %1807 = vmatprep.mubr.bf16.mxu0 0
  %1808 = vmatmul.mubr.bf16.gmra.mrb[0].mxu0 %v1108
  %v1809 = vpop.f32.mrb[0].mxu0
  %v1810 = vadd.f32 %v281, %v1809
  %v1811 = vpop.f32.mrb[0].mxu0
  %v1812 = vpop.f32.mrb[0].mxu0
  %v1813 = vadd.f32 %v281, %v1812
  %v1814 = vpop.f32.mrb[0].mxu0
  %1815 = vmatprep.mubr.bf16.mxu0 0
  %1816 = vmatmul.mubr.bf16.gmra.mrb[0].mxu0 %v1111
  %v1817 = vpop.f32.mrb[0].mxu0
  %v1818 = vadd.f32 %v281, %v1817
  %v1819 = vpop.f32.mrb[0].mxu0
  %v1820 = vpop.f32.mrb[0].mxu0
  %v1821 = vadd.f32 %v281, %v1820
  %v1822 = vpop.f32.mrb[0].mxu0
  %1823 = vmatprep.mubr.bf16.mxu0 0
  %1824 = vmatmul.mubr.bf16.gmra.mrb[0].mxu0 %v1114
  %v1825 = vpop.f32.mrb[0].mxu0
  %v1826 = vadd.f32 %v281, %v1825
  %v1827 = vpop.f32.mrb[0].mxu0
  %v1828 = vpop.f32.mrb[0].mxu0
  %v1829 = vadd.f32 %v281, %v1828
  %v1830 = vpop.f32.mrb[0].mxu0
  %1831 = vmatprep.mubr.bf16.mxu0 0
  %1832 = vmatmul.mubr.bf16.gmra.mrb[0].mxu0 %v1117
  %v1833 = vpop.f32.mrb[0].mxu0
  %v1834 = vadd.f32 %v281, %v1833
  %v1835 = vpop.f32.mrb[0].mxu0
  %v1836 = vpop.f32.mrb[0].mxu0
  %v1837 = vadd.f32 %v281, %v1836
  %v1838 = vpop.f32.mrb[0].mxu0
  %1839 = vmatprep.mubr.bf16.mxu0 0
  %1840 = vmatmul.mubr.bf16.gmra.mrb[0].mxu0 %v1120
  %v1841 = vpop.f32.mrb[0].mxu0
  %v1842 = vadd.f32 %v281, %v1841
  %v1843 = vpop.f32.mrb[0].mxu0
  %v1844 = vpop.f32.mrb[0].mxu0
  %v1845 = vadd.f32 %v281, %v1844
  %v1846 = vpop.f32.mrb[0].mxu0
  %1847 = vmatprep.mubr.bf16.mxu0 0
  %1848 = vmatmul.mubr.bf16.gmra.mrb[0].mxu0 %v1123
  %v1849 = vpop.f32.mrb[0].mxu0
  %v1850 = vadd.f32 %v281, %v1849
  %v1851 = vpop.f32.mrb[0].mxu0
  %v1852 = vpop.f32.mrb[0].mxu0
  %v1853 = vadd.f32 %v281, %v1852
  %v1854 = vpop.f32.mrb[0].mxu0
  %1855 = vmatprep.mubr.bf16.mxu0 0
  %1856 = vmatmul.mubr.bf16.gmra.mrb[0].mxu0 %v1126
  %v1857 = vpop.f32.mrb[0].mxu0
  %v1858 = vadd.f32 %v281, %v1857
  %v1859 = vpop.f32.mrb[0].mxu0
  %v1860 = vpop.f32.mrb[0].mxu0
  %v1861 = vadd.f32 %v281, %v1860
  %v1862 = vpop.f32.mrb[0].mxu0
  %1863 = vmatprep.mubr.bf16.mxu0 0
  %1864 = vmatmul.mubr.bf16.gmra.mrb[0].mxu0 %v1129
  %v1865 = vpop.f32.mrb[0].mxu0
  %v1866 = vadd.f32 %v281, %v1865
  %v1867 = vpop.f32.mrb[0].mxu0
  %v1868 = vpop.f32.mrb[0].mxu0
  %v1869 = vadd.f32 %v281, %v1868
  %v1870 = vpop.f32.mrb[0].mxu0
  %1871 = vmatprep.mubr.bf16.mxu0 0
  %1872 = vmatmul.mubr.bf16.gmra.mrb[0].mxu0 %v1132
  %v1873 = vpop.f32.mrb[0].mxu0
  %v1874 = vadd.f32 %v281, %v1873
  %v1875 = vpop.f32.mrb[0].mxu0
  %v1876 = vpop.f32.mrb[0].mxu0
  %v1877 = vadd.f32 %v281, %v1876
  %v1878 = vpop.f32.mrb[0].mxu0
  %1879 = vmatprep.mubr.bf16.mxu0 0
  %1880 = vmatmul.mubr.bf16.gmra.mrb[0].mxu0 %v1135
  %v1881 = vpop.f32.mrb[0].mxu0
  %v1882 = vadd.f32 %v281, %v1881
  %v1883 = vpop.f32.mrb[0].mxu0
  %v1884 = vpop.f32.mrb[0].mxu0
  %v1885 = vadd.f32 %v281, %v1884
  %v1886 = vpop.f32.mrb[0].mxu0
  %1887 = vmatprep.mubr.bf16.mxu0 0
  %1888 = vmatmul.mubr.bf16.gmra.mrb[0].mxu0 %v1138
  %v1889 = vpop.f32.mrb[0].mxu0
  %v1890 = vadd.f32 %v281, %v1889
  %v1891 = vpop.f32.mrb[0].mxu0
  %v1892 = vpop.f32.mrb[0].mxu0
  %v1893 = vadd.f32 %v281, %v1892
  %v1894 = vpop.f32.mrb[0].mxu0
  %1895 = vmatprep.mubr.bf16.mxu0 0
  %1896 = vmatmul.mubr.bf16.gmra.mrb[0].mxu0 %v1141
  %v1897 = vpop.f32.mrb[0].mxu0
  %v1898 = vadd.f32 %v281, %v1897
  %v1899 = vpop.f32.mrb[0].mxu0
  %v1900 = vpop.f32.mrb[0].mxu0
  %v1901 = vadd.f32 %v281, %v1900
  %v1902 = vpop.f32.mrb[0].mxu0
  %1903 = vmatprep.mubr.bf16.mxu0 0
  %1904 = vmatmul.mubr.bf16.gmra.mrb[0].mxu0 %v1144
  %v1905 = vpop.f32.mrb[0].mxu0
  %v1906 = vadd.f32 %v281, %v1905
  %v1907 = vpop.f32.mrb[0].mxu0
  %v1908 = vpop.f32.mrb[0].mxu0
  %v1909 = vadd.f32 %v281, %v1908
  %v1910 = vpop.f32.mrb[0].mxu0
  %1911 = vmatprep.mubr.bf16.mxu0 0
  %1912 = vmatmul.mubr.bf16.gmra.mrb[0].mxu0 %v1147
  %v1913 = vpop.f32.mrb[0].mxu0
  %v1914 = vadd.f32 %v281, %v1913
  %v1915 = vpop.f32.mrb[0].mxu0
  %v1916 = vpop.f32.mrb[0].mxu0
  %v1917 = vadd.f32 %v281, %v1916
  %v1918 = vpop.f32.mrb[0].mxu0
  %1919 = vmatprep.mubr.bf16.mxu0 0
  %1920 = vmatmul.mubr.bf16.gmra.mrb[0].mxu0 %v1150
  %v1921 = vpop.f32.mrb[0].mxu0
  %v1922 = vadd.f32 %v281, %v1921
  %v1923 = vpop.f32.mrb[0].mxu0
  %v1924 = vpop.f32.mrb[0].mxu0
  %v1925 = vadd.f32 %v281, %v1924
  %v1926 = vpop.f32.mrb[0].mxu0
  %1927 = vmatprep.mubr.bf16.mxu0 0
  %1928 = vmatmul.mubr.bf16.gmra.mrb[0].mxu0 %v1153
  %v1929 = vpop.f32.mrb[0].mxu0
  %v1930 = vadd.f32 %v281, %v1929
  %v1931 = vpop.f32.mrb[0].mxu0
  %v1932 = vpop.f32.mrb[0].mxu0
  %v1933 = vadd.f32 %v281, %v1932
  %v1934 = vpop.f32.mrb[0].mxu0
  %1935 = vmatprep.mubr.bf16.mxu0 0
  %1936 = vmatmul.mubr.bf16.gmra.mrb[0].mxu0 %v1156
  %v1937 = vpop.f32.mrb[0].mxu0
  %v1938 = vadd.f32 %v281, %v1937
  %v1939 = vpop.f32.mrb[0].mxu0
  %v1940 = vpop.f32.mrb[0].mxu0
  %v1941 = vadd.f32 %v281, %v1940
  %v1942 = vpop.f32.mrb[0].mxu0
  %1943 = vmatprep.mubr.bf16.mxu0 0
  %1944 = vmatmul.mubr.bf16.gmra.mrb[0].mxu0 %v1159
  %v1945 = vpop.f32.mrb[0].mxu0
  %v1946 = vadd.f32 %v281, %v1945
  %v1947 = vpop.f32.mrb[0].mxu0
  %v1948 = vpop.f32.mrb[0].mxu0
  %v1949 = vadd.f32 %v281, %v1948
  %v1950 = vpop.f32.mrb[0].mxu0
  %1951 = vmatprep.mubr.bf16.mxu0 0
  %1952 = vmatmul.mubr.bf16.gmra.mrb[0].mxu0 %v1162
  %v1953 = vpop.f32.mrb[0].mxu0
  %v1954 = vadd.f32 %v281, %v1953
  %v1955 = vpop.f32.mrb[0].mxu0
  %v1956 = vpop.f32.mrb[0].mxu0
  %v1957 = vadd.f32 %v281, %v1956
  %v1958 = vpop.f32.mrb[0].mxu0
  %1959 = vmatprep.mubr.bf16.mxu0 0
  %1960 = vmatmul.mubr.bf16.gmra.mrb[0].mxu0 %v1165
  %v1961 = vpop.f32.mrb[0].mxu0
  %v1962 = vadd.f32 %v281, %v1961
  %v1963 = vpop.f32.mrb[0].mxu0
  %v1964 = vpop.f32.mrb[0].mxu0
  %v1965 = vadd.f32 %v281, %v1964
  %v1966 = vpop.f32.mrb[0].mxu0
  %1967 = vmatprep.mubr.bf16.mxu0 0
  %1968 = vmatmul.mubr.bf16.gmra.mrb[0].mxu0 %v1168
  %v1969 = vpop.f32.mrb[0].mxu0
  %v1970 = vadd.f32 %v281, %v1969
  %v1971 = vpop.f32.mrb[0].mxu0
  %v1972 = vpop.f32.mrb[0].mxu0
  %v1973 = vadd.f32 %v281, %v1972
  %v1974 = vpop.f32.mrb[0].mxu0
  %1975 = vmatprep.mubr.bf16.mxu0 0
  %1976 = vmatmul.mubr.bf16.gmra.mrb[0].mxu0 %v1171
  %v1977 = vpop.f32.mrb[0].mxu0
  %v1978 = vadd.f32 %v281, %v1977
  %v1979 = vpop.f32.mrb[0].mxu0
  %v1980 = vpop.f32.mrb[0].mxu0
  %v1981 = vadd.f32 %v281, %v1980
  %v1982 = vpop.f32.mrb[0].mxu0
  %1983 = vmatprep.mubr.bf16.mxu0 0
  %1984 = vmatmul.mubr.bf16.gmra.mrb[0].mxu0 %v1174
  %v1985 = vpop.f32.mrb[0].mxu0
  %v1986 = vadd.f32 %v281, %v1985
  %v1987 = vpop.f32.mrb[0].mxu0
  %v1988 = vpop.f32.mrb[0].mxu0
  %v1989 = vadd.f32 %v281, %v1988
  %v1990 = vpop.f32.mrb[0].mxu0
  %1991 = vmatprep.mubr.bf16.mxu0 0
  %1992 = vmatmul.mubr.bf16.gmra.mrb[0].mxu0 %v1177
  %v1993 = vpop.f32.mrb[0].mxu0
  %v1994 = vadd.f32 %v281, %v1993
  %v1995 = vpop.f32.mrb[0].mxu0
  %v1996 = vpop.f32.mrb[0].mxu0
  %v1997 = vadd.f32 %v281, %v1996
  %v1998 = vpop.f32.mrb[0].mxu0
  %1999 = vmatprep.mubr.bf16.mxu0 0
  %2000 = vmatmul.mubr.bf16.gmra.mrb[0].mxu0 %v1180
  %v2001 = vpop.f32.mrb[0].mxu0
  %v2002 = vadd.f32 %v281, %v2001
  %v2003 = vpop.f32.mrb[0].mxu0
  %v2004 = vpop.f32.mrb[0].mxu0
  %v2005 = vadd.f32 %v281, %v2004
  %v2006 = vpop.f32.mrb[0].mxu0
  %2007 = vmatprep.mubr.bf16.mxu0 0
  %2008 = vmatmul.mubr.bf16.gmra.mrb[0].mxu0 %v1183
  %v2009 = vpop.f32.mrb[0].mxu0
  %v2010 = vadd.f32 %v281, %v2009
  %v2011 = vpop.f32.mrb[0].mxu0
  %v2012 = vpop.f32.mrb[0].mxu0
  %v2013 = vadd.f32 %v281, %v2012
  %v2014 = vpop.f32.mrb[0].mxu0
  %2015 = vmatprep.mubr.bf16.mxu0 0
  %2016 = vmatmul.mubr.bf16.gmra.mrb[0].mxu0 %v1186
  %v2017 = vpop.f32.mrb[0].mxu0
  %v2018 = vadd.f32 %v281, %v2017
  %v2019 = vpop.f32.mrb[0].mxu0
  %v2020 = vpop.f32.mrb[0].mxu0
  %v2021 = vadd.f32 %v281, %v2020
  %v2022 = vpop.f32.mrb[0].mxu0
  %2023 = vmatprep.mubr.bf16.mxu0 0
  %2024 = vmatmul.mubr.bf16.gmra.mrb[0].mxu0 %v1189
  %v2025 = vpop.f32.mrb[0].mxu0
  %v2026 = vadd.f32 %v281, %v2025
  %v2027 = vpop.f32.mrb[0].mxu0
  %v2028 = vpop.f32.mrb[0].mxu0
  %v2029 = vadd.f32 %v281, %v2028
  %v2030 = vpop.f32.mrb[0].mxu0
  %2031 = vmatprep.mubr.bf16.mxu0 0
  %2032 = vmatmul.mubr.bf16.gmra.mrb[0].mxu0 %v1192
  %v2033 = vpop.f32.mrb[0].mxu0
  %v2034 = vadd.f32 %v281, %v2033
  %v2035 = vpop.f32.mrb[0].mxu0
  %v2036 = vpop.f32.mrb[0].mxu0
  %v2037 = vadd.f32 %v281, %v2036
  %v2038 = vpop.f32.mrb[0].mxu0
  %2039 = vmatprep.mubr.bf16.mxu0 0
  %2040 = vmatmul.mubr.bf16.gmra.mrb[0].mxu0 %v1195
  %v2041 = vpop.f32.mrb[0].mxu0
  %v2042 = vadd.f32 %v281, %v2041
  %v2043 = vpop.f32.mrb[0].mxu0
  %v2044 = vpop.f32.mrb[0].mxu0
  %v2045 = vadd.f32 %v281, %v2044
  %v2046 = vpop.f32.mrb[0].mxu0
  %2047 = vmatprep.mubr.bf16.mxu0 0
  %2048 = vmatmul.mubr.bf16.gmra.mrb[0].mxu0 %v1198
  %v2049 = vpop.f32.mrb[0].mxu0
  %v2050 = vadd.f32 %v281, %v2049
  %v2051 = vpop.f32.mrb[0].mxu0
  %v2052 = vpop.f32.mrb[0].mxu0
  %v2053 = vadd.f32 %v281, %v2052
  %v2054 = vpop.f32.mrb[0].mxu0
  %2055 = vmatprep.mubr.bf16.mxu0 0
  %2056 = vmatmul.mubr.bf16.gmra.mrb[0].mxu0 %v1201
  %v2057 = vpop.f32.mrb[0].mxu0
  %v2058 = vadd.f32 %v281, %v2057
  %v2059 = vpop.f32.mrb[0].mxu0
  %v2060 = vpop.f32.mrb[0].mxu0
  %v2061 = vadd.f32 %v281, %v2060
  %v2062 = vpop.f32.mrb[0].mxu0
  %2063 = vmatprep.mubr.bf16.mxu0 0
  %2064 = vmatmul.mubr.bf16.gmra.mrb[0].mxu0 %v1204
  %v2065 = vpop.f32.mrb[0].mxu0
  %v2066 = vadd.f32 %v281, %v2065
  %v2067 = vpop.f32.mrb[0].mxu0
  %v2068 = vpop.f32.mrb[0].mxu0
  %v2069 = vadd.f32 %v281, %v2068
  %v2070 = vpop.f32.mrb[0].mxu0
  %2071 = vmatprep.mubr.bf16.mxu0 0
  %2072 = vmatmul.mubr.bf16.gmra.mrb[0].mxu0 %v1207
  %v2073 = vpop.f32.mrb[0].mxu0
  %v2074 = vadd.f32 %v281, %v2073
  %v2075 = vpop.f32.mrb[0].mxu0
  %v2076 = vpop.f32.mrb[0].mxu0
  %v2077 = vadd.f32 %v281, %v2076
  %v2078 = vpop.f32.mrb[0].mxu0
  %2079 = vmatprep.mubr.bf16.mxu0 0
  %2080 = vmatmul.mubr.bf16.gmra.mrb[0].mxu0 %v1210
  %v2081 = vpop.f32.mrb[0].mxu0
  %v2082 = vadd.f32 %v281, %v2081
  %v2083 = vpop.f32.mrb[0].mxu0
  %v2084 = vpop.f32.mrb[0].mxu0
  %v2085 = vadd.f32 %v281, %v2084
  %v2086 = vpop.f32.mrb[0].mxu0
  %2087 = vmatprep.mubr.bf16.mxu0 0
  %2088 = vmatmul.mubr.bf16.gmra.mrb[0].mxu0 %v1213
  %v2089 = vpop.f32.mrb[0].mxu0
  %v2090 = vadd.f32 %v281, %v2089
  %v2091 = vpop.f32.mrb[0].mxu0
  %v2092 = vpop.f32.mrb[0].mxu0
  %v2093 = vadd.f32 %v281, %v2092
  %v2094 = vpop.f32.mrb[0].mxu0
  %2095 = vmatprep.mubr.bf16.mxu0 0
  %2096 = vmatmul.mubr.bf16.gmra.mrb[0].mxu0 %v1216
  %v2097 = vpop.f32.mrb[0].mxu0
  %v2098 = vadd.f32 %v281, %v2097
  %v2099 = vpop.f32.mrb[0].mxu0
  %v2100 = vpop.f32.mrb[0].mxu0
  %v2101 = vadd.f32 %v281, %v2100
  %v2102 = vpop.f32.mrb[0].mxu0
  %2103 = vmatprep.mubr.bf16.mxu0 0
  %2104 = vmatmul.mubr.bf16.gmra.mrb[0].mxu0 %v1219
  %v2105 = vpop.f32.mrb[0].mxu0
  %v2106 = vadd.f32 %v281, %v2105
  %v2107 = vpop.f32.mrb[0].mxu0
  %v2108 = vpop.f32.mrb[0].mxu0
  %v2109 = vadd.f32 %v281, %v2108
  %v2110 = vpop.f32.mrb[0].mxu0
  %2111 = vmatprep.mubr.bf16.mxu0 0
  %2112 = vmatmul.mubr.bf16.gmra.mrb[0].mxu0 %v1222
  %v2113 = vpop.f32.mrb[0].mxu0
  %v2114 = vadd.f32 %v281, %v2113
  %v2115 = vpop.f32.mrb[0].mxu0
  %v2116 = vpop.f32.mrb[0].mxu0
  %v2117 = vadd.f32 %v281, %v2116
  %v2118 = vpop.f32.mrb[0].mxu0
  %2119 = vmatprep.mubr.bf16.mxu0 0
  %2120 = vmatmul.mubr.bf16.gmra.mrb[0].mxu0 %v1225
  %v2121 = vpop.f32.mrb[0].mxu0
  %v2122 = vadd.f32 %v281, %v2121
  %v2123 = vpop.f32.mrb[0].mxu0
  %v2124 = vpop.f32.mrb[0].mxu0
  %v2125 = vadd.f32 %v281, %v2124
  %v2126 = vpop.f32.mrb[0].mxu0
  %2127 = vmatprep.mubr.bf16.mxu0 0
  %2128 = vmatmul.mubr.bf16.gmra.mrb[0].mxu0 %v1228
  %v2129 = vpop.f32.mrb[0].mxu0
  %v2130 = vadd.f32 %v281, %v2129
  %v2131 = vpop.f32.mrb[0].mxu0
  %v2132 = vpop.f32.mrb[0].mxu0
  %v2133 = vadd.f32 %v281, %v2132
  %v2134 = vpop.f32.mrb[0].mxu0
  %2135 = vmatprep.mubr.bf16.mxu0 0
  %2136 = vmatmul.mubr.bf16.gmra.mrb[0].mxu0 %v1231
  %v2137 = vpop.f32.mrb[0].mxu0
  %v2138 = vadd.f32 %v281, %v2137
  %v2139 = vpop.f32.mrb[0].mxu0
  %v2140 = vpop.f32.mrb[0].mxu0
  %v2141 = vadd.f32 %v281, %v2140
  %v2142 = vpop.f32.mrb[0].mxu0
  %2143 = vmatprep.mubr.bf16.mxu0 0
  %2144 = vmatmul.mubr.bf16.gmra.mrb[0].mxu0 %v1234
  %v2145 = vpop.f32.mrb[0].mxu0
  %v2146 = vadd.f32 %v281, %v2145
  %v2147 = vpop.f32.mrb[0].mxu0
  %v2148 = vpop.f32.mrb[0].mxu0
  %v2149 = vadd.f32 %v281, %v2148
  %v2150 = vpop.f32.mrb[0].mxu0
  %2151 = vmatprep.mubr.bf16.mxu0 0
  %2152 = vmatmul.mubr.bf16.gmra.mrb[0].mxu0 %v1237
  %v2153 = vpop.f32.mrb[0].mxu0
  %v2154 = vadd.f32 %v281, %v2153
  %v2155 = vpop.f32.mrb[0].mxu0
  %v2156 = vpop.f32.mrb[0].mxu0
  %v2157 = vadd.f32 %v281, %v2156
  %v2158 = vpop.f32.mrb[0].mxu0
  %2159 = vmatprep.mubr.bf16.mxu0 0
  %2160 = vmatmul.mubr.bf16.gmra.mrb[0].mxu0 %v1240
  %v2161 = vpop.f32.mrb[0].mxu0
  %v2162 = vadd.f32 %v281, %v2161
  %v2163 = vpop.f32.mrb[0].mxu0
  %v2164 = vpop.f32.mrb[0].mxu0
  %v2165 = vadd.f32 %v281, %v2164
  %v2166 = vpop.f32.mrb[0].mxu0
  %2167 = vmatprep.mubr.bf16.mxu0 0
  %2168 = vmatmul.mubr.bf16.gmra.mrb[0].mxu0 %v1243
  %v2169 = vpop.f32.mrb[0].mxu0
  %v2170 = vadd.f32 %v281, %v2169
  %v2171 = vpop.f32.mrb[0].mxu0
  %v2172 = vpop.f32.mrb[0].mxu0
  %v2173 = vadd.f32 %v281, %v2172
  %v2174 = vpop.f32.mrb[0].mxu0
  %2175 = vmatprep.mubr.bf16.mxu0 0
  %2176 = vmatmul.mubr.bf16.gmra.mrb[0].mxu0 %v1246
  %v2177 = vpop.f32.mrb[0].mxu0
  %v2178 = vadd.f32 %v281, %v2177
  %v2179 = vpop.f32.mrb[0].mxu0
  %v2180 = vpop.f32.mrb[0].mxu0
  %v2181 = vadd.f32 %v281, %v2180
  %v2182 = vpop.f32.mrb[0].mxu0
  %2183 = vmatprep.mubr.bf16.mxu0 0
  %2184 = vmatmul.mubr.bf16.gmra.mrb[0].mxu0 %v1249
  %v2185 = vpop.f32.mrb[0].mxu0
  %v2186 = vadd.f32 %v281, %v2185
  %v2187 = vpop.f32.mrb[0].mxu0
  %v2188 = vpop.f32.mrb[0].mxu0
  %v2189 = vadd.f32 %v281, %v2188
  %v2190 = vpop.f32.mrb[0].mxu0
  %2191 = vmatprep.mubr.bf16.mxu0 0
  %2192 = vmatmul.mubr.bf16.gmra.mrb[0].mxu0 %v1252
  %v2193 = vpop.f32.mrb[0].mxu0
  %v2194 = vadd.f32 %v281, %v2193
  %v2195 = vpop.f32.mrb[0].mxu0
  %v2196 = vpop.f32.mrb[0].mxu0
  %v2197 = vadd.f32 %v281, %v2196
  %v2198 = vpop.f32.mrb[0].mxu0
  %2199 = vmatprep.mubr.bf16.mxu0 0
  %2200 = vmatmul.mubr.bf16.gmra.mrb[0].mxu0 %v1255
  %v2201 = vpop.f32.mrb[0].mxu0
  %v2202 = vadd.f32 %v281, %v2201
  %v2203 = vpop.f32.mrb[0].mxu0
  %v2204 = vpop.f32.mrb[0].mxu0
  %v2205 = vadd.f32 %v281, %v2204
  %v2206 = vpop.f32.mrb[0].mxu0
  %2207 = vmatprep.mubr.bf16.mxu0 0
  %2208 = vmatmul.mubr.bf16.gmra.mrb[0].mxu0 %v1258
  %v2209 = vpop.f32.mrb[0].mxu0
  %v2210 = vadd.f32 %v281, %v2209
  %v2211 = vpop.f32.mrb[0].mxu0
  %v2212 = vpop.f32.mrb[0].mxu0
  %v2213 = vadd.f32 %v281, %v2212
  %v2214 = vpop.f32.mrb[0].mxu0
  %2215 = vmatprep.mubr.bf16.mxu0 0
  %2216 = vmatmul.mubr.bf16.gmra.mrb[0].mxu0 %v1261
  %v2217 = vpop.f32.mrb[0].mxu0
  %v2218 = vadd.f32 %v281, %v2217
  %v2219 = vpop.f32.mrb[0].mxu0
  %v2220 = vpop.f32.mrb[0].mxu0
  %v2221 = vadd.f32 %v281, %v2220
  %v2222 = vpop.f32.mrb[0].mxu0
  %2223 = vmatprep.mubr.bf16.mxu0 0
  %2224 = vmatmul.mubr.bf16.gmra.mrb[0].mxu0 %v1264
  %v2225 = vpop.f32.mrb[0].mxu0
  %v2226 = vadd.f32 %v281, %v2225
  %v2227 = vpop.f32.mrb[0].mxu0
  %v2228 = vpop.f32.mrb[0].mxu0
  %v2229 = vadd.f32 %v281, %v2228
  %v2230 = vpop.f32.mrb[0].mxu0
  %2231 = vmatprep.mubr.bf16.mxu0 0
  %2232 = vmatmul.mubr.bf16.gmra.mrb[0].mxu0 %v1267
  %v2233 = vpop.f32.mrb[0].mxu0
  %v2234 = vadd.f32 %v281, %v2233
  %v2235 = vpop.f32.mrb[0].mxu0
  %v2236 = vpop.f32.mrb[0].mxu0
  %v2237 = vadd.f32 %v281, %v2236
  %v2238 = vpop.f32.mrb[0].mxu0
  %2239 = vmatprep.mubr.bf16.mxu0 0
  %2240 = vmatmul.mubr.bf16.gmra.mrb[0].mxu0 %v1270
  %v2241 = vpop.f32.mrb[0].mxu0
  %v2242 = vadd.f32 %v281, %v2241
  %v2243 = vpop.f32.mrb[0].mxu0
  %v2244 = vpop.f32.mrb[0].mxu0
  %v2245 = vadd.f32 %v281, %v2244
  %v2246 = vpop.f32.mrb[0].mxu0
  %2247 = vmatprep.mubr.bf16.mxu0 0
  %2248 = vmatmul.mubr.bf16.gmra.mrb[0].mxu0 %v1273
  %v2249 = vpop.f32.mrb[0].mxu0
  %v2250 = vadd.f32 %v281, %v2249
  %v2251 = vpop.f32.mrb[0].mxu0
  %v2252 = vpop.f32.mrb[0].mxu0
  %v2253 = vadd.f32 %v281, %v2252
  %v2254 = vpop.f32.mrb[0].mxu0
  %2255 = vmatprep.mubr.bf16.mxu0 0
  %2256 = vmatmul.mubr.bf16.gmra.mrb[0].mxu0 %v1276
  %v2257 = vpop.f32.mrb[0].mxu0
  %v2258 = vadd.f32 %v281, %v2257
  %v2259 = vpop.f32.mrb[0].mxu0
  %v2260 = vpop.f32.mrb[0].mxu0
  %v2261 = vadd.f32 %v281, %v2260
  %v2262 = vpop.f32.mrb[0].mxu0
  %2263 = vmatprep.mubr.bf16.mxu0 0
  %2264 = vmatmul.mubr.bf16.gmra.mrb[0].mxu0 %v1279
  %v2265 = vpop.f32.mrb[0].mxu0
  %v2266 = vadd.f32 %v281, %v2265
  %v2267 = vpop.f32.mrb[0].mxu0
  %v2268 = vpop.f32.mrb[0].mxu0
  %v2269 = vadd.f32 %v281, %v2268
  %v2270 = vpop.f32.mrb[0].mxu0
  %2271 = vmatprep.mubr.bf16.mxu0 0
  %2272 = vmatmul.mubr.bf16.gmra.mrb[0].mxu0 %v1282
  %v2273 = vpop.f32.mrb[0].mxu0
  %v2274 = vadd.f32 %v281, %v2273
  %v2275 = vpop.f32.mrb[0].mxu0
  %v2276 = vpop.f32.mrb[0].mxu0
  %v2277 = vadd.f32 %v281, %v2276
  %v2278 = vpop.f32.mrb[0].mxu0
  %2279 = vmatprep.mubr.bf16.mxu0 0
  %2280 = vmatmul.mubr.bf16.gmra.mrb[0].mxu0 %v1285
  %v2281 = vpop.f32.mrb[0].mxu0
  %v2282 = vadd.f32 %v281, %v2281
  %v2283 = vpop.f32.mrb[0].mxu0
  %v2284 = vpop.f32.mrb[0].mxu0
  %v2285 = vadd.f32 %v281, %v2284
  %v2286 = vpop.f32.mrb[0].mxu0
  %2287 = vmatprep.mubr.bf16.mxu0 0
  %2288 = vmatmul.mubr.bf16.gmra.mrb[0].mxu0 %v1288
  %v2289 = vpop.f32.mrb[0].mxu0
  %v2290 = vadd.f32 %v281, %v2289
  %v2291 = vpop.f32.mrb[0].mxu0
  %v2292 = vpop.f32.mrb[0].mxu0
  %v2293 = vadd.f32 %v281, %v2292
  %v2294 = vpop.f32.mrb[0].mxu0
  %2295 = vmatprep.mubr.bf16.mxu0 0
  %2296 = vmatmul.mubr.bf16.gmra.mrb[0].mxu0 %v1291
  %v2297 = vpop.f32.mrb[0].mxu0
  %v2298 = vadd.f32 %v281, %v2297
  %v2299 = vpop.f32.mrb[0].mxu0
  %v2300 = vpop.f32.mrb[0].mxu0
  %v2301 = vadd.f32 %v281, %v2300
  %v2302 = vpop.f32.mrb[0].mxu0
  %2303 = vmatprep.mubr.bf16.mxu0 0
  %2304 = vmatmul.mubr.bf16.gmra.mrb[0].mxu0 %v1294
  %v2305 = vpop.f32.mrb[0].mxu0
  %v2306 = vadd.f32 %v281, %v2305
  %v2307 = vpop.f32.mrb[0].mxu0
  %v2308 = vpop.f32.mrb[0].mxu0
  %v2309 = vadd.f32 %v281, %v2308
  %v2310 = vpop.f32.mrb[0].mxu0
  %2311 = vmatprep.mubr.bf16.mxu0 0
  %2312 = vmatmul.mubr.bf16.gmra.mrb[0].mxu0 %v1297
  %v2313 = vpop.f32.mrb[0].mxu0
  %v2314 = vadd.f32 %v281, %v2313
  %v2315 = vpop.f32.mrb[0].mxu0
  %v2316 = vpop.f32.mrb[0].mxu0
  %v2317 = vadd.f32 %v281, %v2316
  %v2318 = vpop.f32.mrb[0].mxu0
  %2319 = vmatprep.mubr.bf16.mxu0 0
  %2320 = vmatmul.mubr.bf16.gmra.mrb[0].mxu0 %v1300
  %v2321 = vpop.f32.mrb[0].mxu0
  %v2322 = vadd.f32 %v281, %v2321
  %v2323 = vpop.f32.mrb[0].mxu0
  %v2324 = vpop.f32.mrb[0].mxu0
  %v2325 = vadd.f32 %v281, %v2324
  %v2326 = vpop.f32.mrb[0].mxu0
  %2327 = vmatprep.mubr.bf16.mxu0 0
  %2328 = vmatmul.mubr.bf16.gmra.mrb[0].mxu0 %v1303
  %v2329 = vpop.f32.mrb[0].mxu0
  %v2330 = vadd.f32 %v281, %v2329
  %v2331 = vpop.f32.mrb[0].mxu0
  %v2332 = vpop.f32.mrb[0].mxu0
  %v2333 = vadd.f32 %v281, %v2332
  %v2334 = vpop.f32.mrb[0].mxu0
  %2335 = vmatprep.mubr.bf16.mxu0 0
  %2336 = vmatmul.mubr.bf16.gmra.mrb[0].mxu0 %v1306
  %v2337 = vpop.f32.mrb[0].mxu0
  %v2338 = vadd.f32 %v281, %v2337
  %v2339 = vpop.f32.mrb[0].mxu0
  %v2340 = vpop.f32.mrb[0].mxu0
  %v2341 = vadd.f32 %v281, %v2340
  %v2342 = vpop.f32.mrb[0].mxu0
  %2343 = vmatprep.mubr.bf16.mxu0 0
  %2344 = vmatmul.mubr.bf16.gmra.mrb[0].mxu0 %v1309
  %v2345 = vpop.f32.mrb[0].mxu0
  %v2346 = vadd.f32 %v281, %v2345
  %v2347 = vpop.f32.mrb[0].mxu0
  %v2348 = vpop.f32.mrb[0].mxu0
  %v2349 = vadd.f32 %v281, %v2348
  %v2350 = vpop.f32.mrb[0].mxu0
  %2351 = vmatprep.mubr.bf16.mxu0 0
  %2352 = vmatmul.mubr.bf16.gmra.mrb[0].mxu0 %v1312
  %v2353 = vpop.f32.mrb[0].mxu0
  %v2354 = vadd.f32 %v281, %v2353
  %v2355 = vpop.f32.mrb[0].mxu0
  %v2356 = vpop.f32.mrb[0].mxu0
  %v2357 = vadd.f32 %v281, %v2356
  %v2358 = vpop.f32.mrb[0].mxu0
  %2359 = vmatprep.mubr.bf16.mxu0 0
  %2360 = vmatmul.mubr.bf16.gmra.mrb[0].mxu0 %v1315
  %v2361 = vpop.f32.mrb[0].mxu0
  %v2362 = vadd.f32 %v281, %v2361
  %v2363 = vpop.f32.mrb[0].mxu0
  %v2364 = vpop.f32.mrb[0].mxu0
  %v2365 = vadd.f32 %v281, %v2364
  %v2366 = vpop.f32.mrb[0].mxu0
  %2367 = vmatprep.mubr.bf16.mxu0 0
  %2368 = vmatmul.mubr.bf16.gmra.mrb[0].mxu0 %v1318
  %v2369 = vpop.f32.mrb[0].mxu0
  %v2370 = vadd.f32 %v281, %v2369
  %v2371 = vpop.f32.mrb[0].mxu0
  %v2372 = vpop.f32.mrb[0].mxu0
  %v2373 = vadd.f32 %v281, %v2372
  %v2374 = vpop.f32.mrb[0].mxu0
  %2375 = vmatprep.mubr.bf16.mxu0 0
  %2376 = vmatmul.mubr.bf16.gmra.mrb[0].mxu0 %v1321
  %v2377 = vpop.f32.mrb[0].mxu0
  %v2378 = vadd.f32 %v281, %v2377
  %v2379 = vpop.f32.mrb[0].mxu0
  %v2380 = vpop.f32.mrb[0].mxu0
  %v2381 = vadd.f32 %v281, %v2380
  %v2382 = vpop.f32.mrb[0].mxu0
  %2383 = vdwg.mxu0
  %v2384 = vmax.f32 %v1362, 0.0
  %v2385 = vmax.f32 %v1365, 0.0
  %v2386 = vmax.f32 %v1370, 0.0
  %v2387 = vmax.f32 %v1373, 0.0
  %v2388 = vmax.f32 %v1378, 0.0
  %v2389 = vmax.f32 %v1381, 0.0
  %v2390 = vmax.f32 %v1386, 0.0
  %v2391 = vmax.f32 %v1389, 0.0
  %v2392 = vmax.f32 %v1394, 0.0
  %v2393 = vmax.f32 %v1397, 0.0
  %v2394 = vmax.f32 %v1402, 0.0
  %v2395 = vmax.f32 %v1405, 0.0
  %v2396 = vmax.f32 %v1410, 0.0
  %v2397 = vmax.f32 %v1413, 0.0
  %v2398 = vmax.f32 %v1418, 0.0
  %v2399 = vmax.f32 %v1421, 0.0
  %v2400 = vmax.f32 %v1426, 0.0
  %v2401 = vmax.f32 %v1429, 0.0
  %v2402 = vmax.f32 %v1434, 0.0
  %v2403 = vmax.f32 %v1437, 0.0
  %v2404 = vmax.f32 %v1442, 0.0
  %v2405 = vmax.f32 %v1445, 0.0
  %v2406 = vmax.f32 %v1450, 0.0
  %v2407 = vmax.f32 %v1453, 0.0
  %v2408 = vmax.f32 %v1458, 0.0
  %v2409 = vmax.f32 %v1461, 0.0
  %v2410 = vmax.f32 %v1466, 0.0
  %v2411 = vmax.f32 %v1469, 0.0
  %v2412 = vmax.f32 %v1474, 0.0
  %v2413 = vmax.f32 %v1477, 0.0
  %v2414 = vmax.f32 %v1482, 0.0
  %v2415 = vmax.f32 %v1485, 0.0
  %v2416 = vmax.f32 %v1490, 0.0
  %v2417 = vmax.f32 %v1493, 0.0
  %v2418 = vmax.f32 %v1498, 0.0
  %v2419 = vmax.f32 %v1501, 0.0
  %v2420 = vmax.f32 %v1506, 0.0
  %v2421 = vmax.f32 %v1509, 0.0
  %v2422 = vmax.f32 %v1514, 0.0
  %v2423 = vmax.f32 %v1517, 0.0
  %v2424 = vmax.f32 %v1522, 0.0
  %v2425 = vmax.f32 %v1525, 0.0
  %v2426 = vmax.f32 %v1530, 0.0
  %v2427 = vmax.f32 %v1533, 0.0
  %v2428 = vmax.f32 %v1538, 0.0
  %v2429 = vmax.f32 %v1541, 0.0
  %v2430 = vmax.f32 %v1546, 0.0
  %v2431 = vmax.f32 %v1549, 0.0
  %v2432 = vmax.f32 %v1554, 0.0
  %v2433 = vmax.f32 %v1557, 0.0
  %v2434 = vmax.f32 %v1562, 0.0
  %v2435 = vmax.f32 %v1565, 0.0
  %v2436 = vmax.f32 %v1570, 0.0
  %v2437 = vmax.f32 %v1573, 0.0
  %v2438 = vmax.f32 %v1578, 0.0
  %v2439 = vmax.f32 %v1581, 0.0
  %v2440 = vmax.f32 %v1586, 0.0
  %v2441 = vmax.f32 %v1589, 0.0
  %v2442 = vmax.f32 %v1594, 0.0
  %v2443 = vmax.f32 %v1597, 0.0
  %v2444 = vmax.f32 %v1602, 0.0
  %v2445 = vmax.f32 %v1605, 0.0
  %v2446 = vmax.f32 %v1610, 0.0
  %v2447 = vmax.f32 %v1613, 0.0
  %v2448 = vmax.f32 %v1618, 0.0
  %v2449 = vmax.f32 %v1621, 0.0
  %v2450 = vmax.f32 %v1626, 0.0
  %v2451 = vmax.f32 %v1629, 0.0
  %v2452 = vmax.f32 %v1634, 0.0
  %v2453 = vmax.f32 %v1637, 0.0
  %v2454 = vmax.f32 %v1642, 0.0
  %v2455 = vmax.f32 %v1645, 0.0
  %v2456 = vmax.f32 %v1650, 0.0
  %v2457 = vmax.f32 %v1653, 0.0
  %v2458 = vmax.f32 %v1658, 0.0
  %v2459 = vmax.f32 %v1661, 0.0
  %v2460 = vmax.f32 %v1666, 0.0
  %v2461 = vmax.f32 %v1669, 0.0
  %v2462 = vmax.f32 %v1674, 0.0
  %v2463 = vmax.f32 %v1677, 0.0
  %v2464 = vmax.f32 %v1682, 0.0
  %v2465 = vmax.f32 %v1685, 0.0
  %v2466 = vmax.f32 %v1690, 0.0
  %v2467 = vmax.f32 %v1693, 0.0
  %v2468 = vmax.f32 %v1698, 0.0
  %v2469 = vmax.f32 %v1701, 0.0
  %v2470 = vmax.f32 %v1706, 0.0
  %v2471 = vmax.f32 %v1709, 0.0
  %v2472 = vmax.f32 %v1714, 0.0
  %v2473 = vmax.f32 %v1717, 0.0
  %v2474 = vmax.f32 %v1722, 0.0
  %v2475 = vmax.f32 %v1725, 0.0
  %v2476 = vmax.f32 %v1730, 0.0
  %v2477 = vmax.f32 %v1733, 0.0
  %v2478 = vmax.f32 %v1738, 0.0
  %v2479 = vmax.f32 %v1741, 0.0
  %v2480 = vmax.f32 %v1746, 0.0
  %v2481 = vmax.f32 %v1749, 0.0
  %v2482 = vmax.f32 %v1754, 0.0
  %v2483 = vmax.f32 %v1757, 0.0
  %v2484 = vmax.f32 %v1762, 0.0
  %v2485 = vmax.f32 %v1765, 0.0
  %v2486 = vmax.f32 %v1770, 0.0
  %v2487 = vmax.f32 %v1773, 0.0
  %v2488 = vmax.f32 %v1778, 0.0
  %v2489 = vmax.f32 %v1781, 0.0
  %v2490 = vmax.f32 %v1786, 0.0
  %v2491 = vmax.f32 %v1789, 0.0
  %v2492 = vmax.f32 %v1794, 0.0
  %v2493 = vmax.f32 %v1797, 0.0
  %v2494 = vmax.f32 %v1802, 0.0
  %v2495 = vmax.f32 %v1805, 0.0
  %v2496 = vmax.f32 %v1810, 0.0
  %v2497 = vmax.f32 %v1813, 0.0
  %v2498 = vmax.f32 %v1818, 0.0
  %v2499 = vmax.f32 %v1821, 0.0
  %v2500 = vmax.f32 %v1826, 0.0
  %v2501 = vmax.f32 %v1829, 0.0
  %v2502 = vmax.f32 %v1834, 0.0
  %v2503 = vmax.f32 %v1837, 0.0
  %v2504 = vmax.f32 %v1842, 0.0
  %v2505 = vmax.f32 %v1845, 0.0
  %v2506 = vmax.f32 %v1850, 0.0
  %v2507 = vmax.f32 %v1853, 0.0
  %v2508 = vmax.f32 %v1858, 0.0
  %v2509 = vmax.f32 %v1861, 0.0
  %v2510 = vmax.f32 %v1866, 0.0
  %v2511 = vmax.f32 %v1869, 0.0
  %v2512 = vmax.f32 %v1874, 0.0
  %v2513 = vmax.f32 %v1877, 0.0
  %v2514 = vmax.f32 %v1882, 0.0
  %v2515 = vmax.f32 %v1885, 0.0
  %v2516 = vmax.f32 %v1890, 0.0
  %v2517 = vmax.f32 %v1893, 0.0
  %v2518 = vmax.f32 %v1898, 0.0
  %v2519 = vmax.f32 %v1901, 0.0
  %v2520 = vmax.f32 %v1906, 0.0
  %v2521 = vmax.f32 %v1909, 0.0
  %v2522 = vmax.f32 %v1914, 0.0
  %v2523 = vmax.f32 %v1917, 0.0
  %v2524 = vmax.f32 %v1922, 0.0
  %v2525 = vmax.f32 %v1925, 0.0
  %v2526 = vmax.f32 %v1930, 0.0
  %v2527 = vmax.f32 %v1933, 0.0
  %v2528 = vmax.f32 %v1938, 0.0
  %v2529 = vmax.f32 %v1941, 0.0
  %v2530 = vmax.f32 %v1946, 0.0
  %v2531 = vmax.f32 %v1949, 0.0
  %v2532 = vmax.f32 %v1954, 0.0
  %v2533 = vmax.f32 %v1957, 0.0
  %v2534 = vmax.f32 %v1962, 0.0
  %v2535 = vmax.f32 %v1965, 0.0
  %v2536 = vmax.f32 %v1970, 0.0
  %v2537 = vmax.f32 %v1973, 0.0
  %v2538 = vmax.f32 %v1978, 0.0
  %v2539 = vmax.f32 %v1981, 0.0
  %v2540 = vmax.f32 %v1986, 0.0
  %v2541 = vmax.f32 %v1989, 0.0
  %v2542 = vmax.f32 %v1994, 0.0
  %v2543 = vmax.f32 %v1997, 0.0
  %v2544 = vmax.f32 %v2002, 0.0
  %v2545 = vmax.f32 %v2005, 0.0
  %v2546 = vmax.f32 %v2010, 0.0
  %v2547 = vmax.f32 %v2013, 0.0
  %v2548 = vmax.f32 %v2018, 0.0
  %v2549 = vmax.f32 %v2021, 0.0
  %v2550 = vmax.f32 %v2026, 0.0
  %v2551 = vmax.f32 %v2029, 0.0
  %v2552 = vmax.f32 %v2034, 0.0
  %v2553 = vmax.f32 %v2037, 0.0
  %v2554 = vmax.f32 %v2042, 0.0
  %v2555 = vmax.f32 %v2045, 0.0
  %v2556 = vmax.f32 %v2050, 0.0
  %v2557 = vmax.f32 %v2053, 0.0
  %v2558 = vmax.f32 %v2058, 0.0
  %v2559 = vmax.f32 %v2061, 0.0
  %v2560 = vmax.f32 %v2066, 0.0
  %v2561 = vmax.f32 %v2069, 0.0
  %v2562 = vmax.f32 %v2074, 0.0
  %v2563 = vmax.f32 %v2077, 0.0
  %v2564 = vmax.f32 %v2082, 0.0
  %v2565 = vmax.f32 %v2085, 0.0
  %v2566 = vmax.f32 %v2090, 0.0
  %v2567 = vmax.f32 %v2093, 0.0
  %v2568 = vmax.f32 %v2098, 0.0
  %v2569 = vmax.f32 %v2101, 0.0
  %v2570 = vmax.f32 %v2106, 0.0
  %v2571 = vmax.f32 %v2109, 0.0
  %v2572 = vmax.f32 %v2114, 0.0
  %v2573 = vmax.f32 %v2117, 0.0
  %v2574 = vmax.f32 %v2122, 0.0
  %v2575 = vmax.f32 %v2125, 0.0
  %v2576 = vmax.f32 %v2130, 0.0
  %v2577 = vmax.f32 %v2133, 0.0
  %v2578 = vmax.f32 %v2138, 0.0
  %v2579 = vmax.f32 %v2141, 0.0
  %v2580 = vmax.f32 %v2146, 0.0
  %v2581 = vmax.f32 %v2149, 0.0
  %v2582 = vmax.f32 %v2154, 0.0
  %v2583 = vmax.f32 %v2157, 0.0
  %v2584 = vmax.f32 %v2162, 0.0
  %v2585 = vmax.f32 %v2165, 0.0
  %v2586 = vmax.f32 %v2170, 0.0
  %v2587 = vmax.f32 %v2173, 0.0
  %v2588 = vmax.f32 %v2178, 0.0
  %v2589 = vmax.f32 %v2181, 0.0
  %v2590 = vmax.f32 %v2186, 0.0
  %v2591 = vmax.f32 %v2189, 0.0
  %v2592 = vmax.f32 %v2194, 0.0
  %v2593 = vmax.f32 %v2197, 0.0
  %v2594 = vmax.f32 %v2202, 0.0
  %v2595 = vmax.f32 %v2205, 0.0
  %v2596 = vmax.f32 %v2210, 0.0
  %v2597 = vmax.f32 %v2213, 0.0
  %v2598 = vmax.f32 %v2218, 0.0
  %v2599 = vmax.f32 %v2221, 0.0
  %v2600 = vmax.f32 %v2226, 0.0
  %v2601 = vmax.f32 %v2229, 0.0
  %v2602 = vmax.f32 %v2234, 0.0
  %v2603 = vmax.f32 %v2237, 0.0
  %v2604 = vmax.f32 %v2242, 0.0
  %v2605 = vmax.f32 %v2245, 0.0
  %v2606 = vmax.f32 %v2250, 0.0
  %v2607 = vmax.f32 %v2253, 0.0
  %v2608 = vmax.f32 %v2258, 0.0
  %v2609 = vmax.f32 %v2261, 0.0
  %v2610 = vmax.f32 %v2266, 0.0
  %v2611 = vmax.f32 %v2269, 0.0
  %v2612 = vmax.f32 %v2274, 0.0
  %v2613 = vmax.f32 %v2277, 0.0
  %v2614 = vmax.f32 %v2282, 0.0
  %v2615 = vmax.f32 %v2285, 0.0
  %v2616 = vmax.f32 %v2290, 0.0
  %v2617 = vmax.f32 %v2293, 0.0
  %v2618 = vmax.f32 %v2298, 0.0
  %v2619 = vmax.f32 %v2301, 0.0
  %v2620 = vmax.f32 %v2306, 0.0
  %v2621 = vmax.f32 %v2309, 0.0
  %v2622 = vmax.f32 %v2314, 0.0
  %v2623 = vmax.f32 %v2317, 0.0
  %v2624 = vmax.f32 %v2322, 0.0
  %v2625 = vmax.f32 %v2325, 0.0
  %v2626 = vmax.f32 %v2330, 0.0
  %v2627 = vmax.f32 %v2333, 0.0
  %v2628 = vmax.f32 %v2338, 0.0
  %v2629 = vmax.f32 %v2341, 0.0
  %v2630 = vmax.f32 %v2346, 0.0
  %v2631 = vmax.f32 %v2349, 0.0
  %v2632 = vmax.f32 %v2354, 0.0
  %v2633 = vmax.f32 %v2357, 0.0
  %v2634 = vmax.f32 %v2362, 0.0
  %v2635 = vmax.f32 %v2365, 0.0
  %v2636 = vmax.f32 %v2370, 0.0
  %v2637 = vmax.f32 %v2373, 0.0
  %v2638 = vmax.f32 %v2378, 0.0
  %v2639 = vmax.f32 %v2381, 0.0
  %vm2640 = vcmask 261120
  %2641 = vst.msk [vmem:[%s3] sm:$0xff] %vm2640, %v2384
  %2642 = vst.msk [vmem:[%s3 + $0x8] sm:$0xff] %vm2640, %v2385
  %2643 = vst.msk [vmem:[%s3 + $0x10] sm:$0xff] %vm2640, %v2386
  %2644 = vst.msk [vmem:[%s3 + $0x18] sm:$0xff] %vm2640, %v2387
  %2645 = vst.msk [vmem:[%s3 + $0x20] sm:$0xff] %vm2640, %v2388
  %2646 = vst.msk [vmem:[%s3 + $0x28] sm:$0xff] %vm2640, %v2389
  %2647 = vst.msk [vmem:[%s3 + $0x30] sm:$0xff] %vm2640, %v2390
  %2648 = vst.msk [vmem:[%s3 + $0x38] sm:$0xff] %vm2640, %v2391
  %2649 = vst.msk [vmem:[%s3 + $0x40] sm:$0xff] %vm2640, %v2392
  %2650 = vst.msk [vmem:[%s3 + $0x48] sm:$0xff] %vm2640, %v2393
  %2651 = vst.msk [vmem:[%s3 + $0x50] sm:$0xff] %vm2640, %v2394
  %2652 = vst.msk [vmem:[%s3 + $0x58] sm:$0xff] %vm2640, %v2395
  %2653 = vst.msk [vmem:[%s3 + $0x60] sm:$0xff] %vm2640, %v2396
  %2654 = vst.msk [vmem:[%s3 + $0x68] sm:$0xff] %vm2640, %v2397
  %2655 = vst.msk [vmem:[%s3 + $0x70] sm:$0xff] %vm2640, %v2398
  %2656 = vst.msk [vmem:[%s3 + $0x78] sm:$0xff] %vm2640, %v2399
  %2657 = vst.msk [vmem:[%s3 + $0x80] sm:$0xff] %vm2640, %v2400
  %2658 = vst.msk [vmem:[%s3 + $0x88] sm:$0xff] %vm2640, %v2401
  %2659 = vst.msk [vmem:[%s3 + $0x90] sm:$0xff] %vm2640, %v2402
  %2660 = vst.msk [vmem:[%s3 + $0x98] sm:$0xff] %vm2640, %v2403
  %2661 = vst.msk [vmem:[%s3 + $0xa0] sm:$0xff] %vm2640, %v2404
  %2662 = vst.msk [vmem:[%s3 + $0xa8] sm:$0xff] %vm2640, %v2405
  %2663 = vst.msk [vmem:[%s3 + $0xb0] sm:$0xff] %vm2640, %v2406
  %2664 = vst.msk [vmem:[%s3 + $0xb8] sm:$0xff] %vm2640, %v2407
  %2665 = vst.msk [vmem:[%s3 + $0xc0] sm:$0xff] %vm2640, %v2408
  %2666 = vst.msk [vmem:[%s3 + $0xc8] sm:$0xff] %vm2640, %v2409
  %2667 = vst.msk [vmem:[%s3 + $0xd0] sm:$0xff] %vm2640, %v2410
  %2668 = vst.msk [vmem:[%s3 + $0xd8] sm:$0xff] %vm2640, %v2411
  %2669 = vst.msk [vmem:[%s3 + $0xe0] sm:$0xff] %vm2640, %v2412
  %2670 = vst.msk [vmem:[%s3 + $0xe8] sm:$0xff] %vm2640, %v2413
  %2671 = vst.msk [vmem:[%s3 + $0xf0] sm:$0xff] %vm2640, %v2414
  %2672 = vst.msk [vmem:[%s3 + $0xf8] sm:$0xff] %vm2640, %v2415
  %2673 = vst.msk [vmem:[%s3 + $0x100] sm:$0xff] %vm2640, %v2416
  %2674 = vst.msk [vmem:[%s3 + $0x108] sm:$0xff] %vm2640, %v2417
  %2675 = vst.msk [vmem:[%s3 + $0x110] sm:$0xff] %vm2640, %v2418
  %2676 = vst.msk [vmem:[%s3 + $0x118] sm:$0xff] %vm2640, %v2419
  %2677 = vst.msk [vmem:[%s3 + $0x120] sm:$0xff] %vm2640, %v2420
  %2678 = vst.msk [vmem:[%s3 + $0x128] sm:$0xff] %vm2640, %v2421
  %2679 = vst.msk [vmem:[%s3 + $0x130] sm:$0xff] %vm2640, %v2422
  %2680 = vst.msk [vmem:[%s3 + $0x138] sm:$0xff] %vm2640, %v2423
  %2681 = vst.msk [vmem:[%s3 + $0x140] sm:$0xff] %vm2640, %v2424
  %2682 = vst.msk [vmem:[%s3 + $0x148] sm:$0xff] %vm2640, %v2425
  %2683 = vst.msk [vmem:[%s3 + $0x150] sm:$0xff] %vm2640, %v2426
  %2684 = vst.msk [vmem:[%s3 + $0x158] sm:$0xff] %vm2640, %v2427
  %2685 = vst.msk [vmem:[%s3 + $0x160] sm:$0xff] %vm2640, %v2428
  %2686 = vst.msk [vmem:[%s3 + $0x168] sm:$0xff] %vm2640, %v2429
  %2687 = vst.msk [vmem:[%s3 + $0x170] sm:$0xff] %vm2640, %v2430
  %2688 = vst.msk [vmem:[%s3 + $0x178] sm:$0xff] %vm2640, %v2431
  %2689 = vst.msk [vmem:[%s3 + $0x180] sm:$0xff] %vm2640, %v2432
  %2690 = vst.msk [vmem:[%s3 + $0x188] sm:$0xff] %vm2640, %v2433
  %2691 = vst.msk [vmem:[%s3 + $0x190] sm:$0xff] %vm2640, %v2434
  %2692 = vst.msk [vmem:[%s3 + $0x198] sm:$0xff] %vm2640, %v2435
  %2693 = vst.msk [vmem:[%s3 + $0x1a0] sm:$0xff] %vm2640, %v2436
  %2694 = vst.msk [vmem:[%s3 + $0x1a8] sm:$0xff] %vm2640, %v2437
  %2695 = vst.msk [vmem:[%s3 + $0x1b0] sm:$0xff] %vm2640, %v2438
  %2696 = vst.msk [vmem:[%s3 + $0x1b8] sm:$0xff] %vm2640, %v2439
  %2697 = vst.msk [vmem:[%s3 + $0x1c0] sm:$0xff] %vm2640, %v2440
  %2698 = vst.msk [vmem:[%s3 + $0x1c8] sm:$0xff] %vm2640, %v2441
  %2699 = vst.msk [vmem:[%s3 + $0x1d0] sm:$0xff] %vm2640, %v2442
  %2700 = vst.msk [vmem:[%s3 + $0x1d8] sm:$0xff] %vm2640, %v2443
  %2701 = vst.msk [vmem:[%s3 + $0x1e0] sm:$0xff] %vm2640, %v2444
  %2702 = vst.msk [vmem:[%s3 + $0x1e8] sm:$0xff] %vm2640, %v2445
  %2703 = vst.msk [vmem:[%s3 + $0x1f0] sm:$0xff] %vm2640, %v2446
  %2704 = vst.msk [vmem:[%s3 + $0x1f8] sm:$0xff] %vm2640, %v2447
  %2705 = vst.msk [vmem:[%s3 + $0x200] sm:$0xff] %vm2640, %v2448
  %2706 = vst.msk [vmem:[%s3 + $0x208] sm:$0xff] %vm2640, %v2449
  %2707 = vst.msk [vmem:[%s3 + $0x210] sm:$0xff] %vm2640, %v2450
  %2708 = vst.msk [vmem:[%s3 + $0x218] sm:$0xff] %vm2640, %v2451
  %2709 = vst.msk [vmem:[%s3 + $0x220] sm:$0xff] %vm2640, %v2452
  %2710 = vst.msk [vmem:[%s3 + $0x228] sm:$0xff] %vm2640, %v2453
  %2711 = vst.msk [vmem:[%s3 + $0x230] sm:$0xff] %vm2640, %v2454
  %2712 = vst.msk [vmem:[%s3 + $0x238] sm:$0xff] %vm2640, %v2455
  %2713 = vst.msk [vmem:[%s3 + $0x240] sm:$0xff] %vm2640, %v2456
  %2714 = vst.msk [vmem:[%s3 + $0x248] sm:$0xff] %vm2640, %v2457
  %2715 = vst.msk [vmem:[%s3 + $0x250] sm:$0xff] %vm2640, %v2458
  %2716 = vst.msk [vmem:[%s3 + $0x258] sm:$0xff] %vm2640, %v2459
  %2717 = vst.msk [vmem:[%s3 + $0x260] sm:$0xff] %vm2640, %v2460
  %2718 = vst.msk [vmem:[%s3 + $0x268] sm:$0xff] %vm2640, %v2461
  %2719 = vst.msk [vmem:[%s3 + $0x270] sm:$0xff] %vm2640, %v2462
  %2720 = vst.msk [vmem:[%s3 + $0x278] sm:$0xff] %vm2640, %v2463
  %2721 = vst.msk [vmem:[%s3 + $0x280] sm:$0xff] %vm2640, %v2464
  %2722 = vst.msk [vmem:[%s3 + $0x288] sm:$0xff] %vm2640, %v2465
  %2723 = vst.msk [vmem:[%s3 + $0x290] sm:$0xff] %vm2640, %v2466
  %2724 = vst.msk [vmem:[%s3 + $0x298] sm:$0xff] %vm2640, %v2467
  %2725 = vst.msk [vmem:[%s3 + $0x2a0] sm:$0xff] %vm2640, %v2468
  %2726 = vst.msk [vmem:[%s3 + $0x2a8] sm:$0xff] %vm2640, %v2469
  %2727 = vst.msk [vmem:[%s3 + $0x2b0] sm:$0xff] %vm2640, %v2470
  %2728 = vst.msk [vmem:[%s3 + $0x2b8] sm:$0xff] %vm2640, %v2471
  %2729 = vst.msk [vmem:[%s3 + $0x2c0] sm:$0xff] %vm2640, %v2472
  %2730 = vst.msk [vmem:[%s3 + $0x2c8] sm:$0xff] %vm2640, %v2473
  %2731 = vst.msk [vmem:[%s3 + $0x2d0] sm:$0xff] %vm2640, %v2474
  %2732 = vst.msk [vmem:[%s3 + $0x2d8] sm:$0xff] %vm2640, %v2475
  %2733 = vst.msk [vmem:[%s3 + $0x2e0] sm:$0xff] %vm2640, %v2476
  %2734 = vst.msk [vmem:[%s3 + $0x2e8] sm:$0xff] %vm2640, %v2477
  %2735 = vst.msk [vmem:[%s3 + $0x2f0] sm:$0xff] %vm2640, %v2478
  %2736 = vst.msk [vmem:[%s3 + $0x2f8] sm:$0xff] %vm2640, %v2479
  %2737 = vst.msk [vmem:[%s3 + $0x300] sm:$0xff] %vm2640, %v2480
  %2738 = vst.msk [vmem:[%s3 + $0x308] sm:$0xff] %vm2640, %v2481
  %2739 = vst.msk [vmem:[%s3 + $0x310] sm:$0xff] %vm2640, %v2482
  %2740 = vst.msk [vmem:[%s3 + $0x318] sm:$0xff] %vm2640, %v2483
  %2741 = vst.msk [vmem:[%s3 + $0x320] sm:$0xff] %vm2640, %v2484
  %2742 = vst.msk [vmem:[%s3 + $0x328] sm:$0xff] %vm2640, %v2485
  %2743 = vst.msk [vmem:[%s3 + $0x330] sm:$0xff] %vm2640, %v2486
  %2744 = vst.msk [vmem:[%s3 + $0x338] sm:$0xff] %vm2640, %v2487
  %2745 = vst.msk [vmem:[%s3 + $0x340] sm:$0xff] %vm2640, %v2488
  %2746 = vst.msk [vmem:[%s3 + $0x348] sm:$0xff] %vm2640, %v2489
  %2747 = vst.msk [vmem:[%s3 + $0x350] sm:$0xff] %vm2640, %v2490
  %2748 = vst.msk [vmem:[%s3 + $0x358] sm:$0xff] %vm2640, %v2491
  %2749 = vst.msk [vmem:[%s3 + $0x360] sm:$0xff] %vm2640, %v2492
  %2750 = vst.msk [vmem:[%s3 + $0x368] sm:$0xff] %vm2640, %v2493
  %2751 = vst.msk [vmem:[%s3 + $0x370] sm:$0xff] %vm2640, %v2494
  %2752 = vst.msk [vmem:[%s3 + $0x378] sm:$0xff] %vm2640, %v2495
  %2753 = vst.msk [vmem:[%s3 + $0x380] sm:$0xff] %vm2640, %v2496
  %2754 = vst.msk [vmem:[%s3 + $0x388] sm:$0xff] %vm2640, %v2497
  %2755 = vst.msk [vmem:[%s3 + $0x390] sm:$0xff] %vm2640, %v2498
  %2756 = vst.msk [vmem:[%s3 + $0x398] sm:$0xff] %vm2640, %v2499
  %2757 = vst.msk [vmem:[%s3 + $0x3a0] sm:$0xff] %vm2640, %v2500
  %2758 = vst.msk [vmem:[%s3 + $0x3a8] sm:$0xff] %vm2640, %v2501
  %2759 = vst.msk [vmem:[%s3 + $0x3b0] sm:$0xff] %vm2640, %v2502
  %2760 = vst.msk [vmem:[%s3 + $0x3b8] sm:$0xff] %vm2640, %v2503
  %2761 = vst.msk [vmem:[%s3 + $0x3c0] sm:$0xff] %vm2640, %v2504
  %2762 = vst.msk [vmem:[%s3 + $0x3c8] sm:$0xff] %vm2640, %v2505
  %2763 = vst.msk [vmem:[%s3 + $0x3d0] sm:$0xff] %vm2640, %v2506
  %2764 = vst.msk [vmem:[%s3 + $0x3d8] sm:$0xff] %vm2640, %v2507
  %2765 = vst.msk [vmem:[%s3 + $0x3e0] sm:$0xff] %vm2640, %v2508
  %2766 = vst.msk [vmem:[%s3 + $0x3e8] sm:$0xff] %vm2640, %v2509
  %2767 = vst.msk [vmem:[%s3 + $0x3f0] sm:$0xff] %vm2640, %v2510
  %2768 = vst.msk [vmem:[%s3 + $0x3f8] sm:$0xff] %vm2640, %v2511
  %2769 = vst.msk [vmem:[%s3 + $0x400] sm:$0xff] %vm2640, %v2512
  %2770 = vst.msk [vmem:[%s3 + $0x408] sm:$0xff] %vm2640, %v2513
  %2771 = vst.msk [vmem:[%s3 + $0x410] sm:$0xff] %vm2640, %v2514
  %2772 = vst.msk [vmem:[%s3 + $0x418] sm:$0xff] %vm2640, %v2515
  %2773 = vst.msk [vmem:[%s3 + $0x420] sm:$0xff] %vm2640, %v2516
  %2774 = vst.msk [vmem:[%s3 + $0x428] sm:$0xff] %vm2640, %v2517
  %2775 = vst.msk [vmem:[%s3 + $0x430] sm:$0xff] %vm2640, %v2518
  %2776 = vst.msk [vmem:[%s3 + $0x438] sm:$0xff] %vm2640, %v2519
  %2777 = vst.msk [vmem:[%s3 + $0x440] sm:$0xff] %vm2640, %v2520
  %2778 = vst.msk [vmem:[%s3 + $0x448] sm:$0xff] %vm2640, %v2521
  %2779 = vst.msk [vmem:[%s3 + $0x450] sm:$0xff] %vm2640, %v2522
  %2780 = vst.msk [vmem:[%s3 + $0x458] sm:$0xff] %vm2640, %v2523
  %2781 = vst.msk [vmem:[%s3 + $0x460] sm:$0xff] %vm2640, %v2524
  %2782 = vst.msk [vmem:[%s3 + $0x468] sm:$0xff] %vm2640, %v2525
  %2783 = vst.msk [vmem:[%s3 + $0x470] sm:$0xff] %vm2640, %v2526
  %2784 = vst.msk [vmem:[%s3 + $0x478] sm:$0xff] %vm2640, %v2527
  %2785 = vst.msk [vmem:[%s3 + $0x480] sm:$0xff] %vm2640, %v2528
  %2786 = vst.msk [vmem:[%s3 + $0x488] sm:$0xff] %vm2640, %v2529
  %2787 = vst.msk [vmem:[%s3 + $0x490] sm:$0xff] %vm2640, %v2530
  %2788 = vst.msk [vmem:[%s3 + $0x498] sm:$0xff] %vm2640, %v2531
  %2789 = vst.msk [vmem:[%s3 + $0x4a0] sm:$0xff] %vm2640, %v2532
  %2790 = vst.msk [vmem:[%s3 + $0x4a8] sm:$0xff] %vm2640, %v2533
  %2791 = vst.msk [vmem:[%s3 + $0x4b0] sm:$0xff] %vm2640, %v2534
  %2792 = vst.msk [vmem:[%s3 + $0x4b8] sm:$0xff] %vm2640, %v2535
  %2793 = vst.msk [vmem:[%s3 + $0x4c0] sm:$0xff] %vm2640, %v2536
  %2794 = vst.msk [vmem:[%s3 + $0x4c8] sm:$0xff] %vm2640, %v2537
  %2795 = vst.msk [vmem:[%s3 + $0x4d0] sm:$0xff] %vm2640, %v2538
  %2796 = vst.msk [vmem:[%s3 + $0x4d8] sm:$0xff] %vm2640, %v2539
  %2797 = vst.msk [vmem:[%s3 + $0x4e0] sm:$0xff] %vm2640, %v2540
  %2798 = vst.msk [vmem:[%s3 + $0x4e8] sm:$0xff] %vm2640, %v2541
  %2799 = vst.msk [vmem:[%s3 + $0x4f0] sm:$0xff] %vm2640, %v2542
  %2800 = vst.msk [vmem:[%s3 + $0x4f8] sm:$0xff] %vm2640, %v2543
  %2801 = vst.msk [vmem:[%s3 + $0x500] sm:$0xff] %vm2640, %v2544
  %2802 = vst.msk [vmem:[%s3 + $0x508] sm:$0xff] %vm2640, %v2545
  %2803 = vst.msk [vmem:[%s3 + $0x510] sm:$0xff] %vm2640, %v2546
  %2804 = vst.msk [vmem:[%s3 + $0x518] sm:$0xff] %vm2640, %v2547
  %2805 = vst.msk [vmem:[%s3 + $0x520] sm:$0xff] %vm2640, %v2548
  %2806 = vst.msk [vmem:[%s3 + $0x528] sm:$0xff] %vm2640, %v2549
  %2807 = vst.msk [vmem:[%s3 + $0x530] sm:$0xff] %vm2640, %v2550
  %2808 = vst.msk [vmem:[%s3 + $0x538] sm:$0xff] %vm2640, %v2551
  %2809 = vst.msk [vmem:[%s3 + $0x540] sm:$0xff] %vm2640, %v2552
  %2810 = vst.msk [vmem:[%s3 + $0x548] sm:$0xff] %vm2640, %v2553
  %2811 = vst.msk [vmem:[%s3 + $0x550] sm:$0xff] %vm2640, %v2554
  %2812 = vst.msk [vmem:[%s3 + $0x558] sm:$0xff] %vm2640, %v2555
  %2813 = vst.msk [vmem:[%s3 + $0x560] sm:$0xff] %vm2640, %v2556
  %2814 = vst.msk [vmem:[%s3 + $0x568] sm:$0xff] %vm2640, %v2557
  %2815 = vst.msk [vmem:[%s3 + $0x570] sm:$0xff] %vm2640, %v2558
  %2816 = vst.msk [vmem:[%s3 + $0x578] sm:$0xff] %vm2640, %v2559
  %2817 = vst.msk [vmem:[%s3 + $0x580] sm:$0xff] %vm2640, %v2560
  %2818 = vst.msk [vmem:[%s3 + $0x588] sm:$0xff] %vm2640, %v2561
  %2819 = vst.msk [vmem:[%s3 + $0x590] sm:$0xff] %vm2640, %v2562
  %2820 = vst.msk [vmem:[%s3 + $0x598] sm:$0xff] %vm2640, %v2563
  %2821 = vst.msk [vmem:[%s3 + $0x5a0] sm:$0xff] %vm2640, %v2564
  %2822 = vst.msk [vmem:[%s3 + $0x5a8] sm:$0xff] %vm2640, %v2565
  %2823 = vst.msk [vmem:[%s3 + $0x5b0] sm:$0xff] %vm2640, %v2566
  %2824 = vst.msk [vmem:[%s3 + $0x5b8] sm:$0xff] %vm2640, %v2567
  %2825 = vst.msk [vmem:[%s3 + $0x5c0] sm:$0xff] %vm2640, %v2568
  %2826 = vst.msk [vmem:[%s3 + $0x5c8] sm:$0xff] %vm2640, %v2569
  %2827 = vst.msk [vmem:[%s3 + $0x5d0] sm:$0xff] %vm2640, %v2570
  %2828 = vst.msk [vmem:[%s3 + $0x5d8] sm:$0xff] %vm2640, %v2571
  %2829 = vst.msk [vmem:[%s3 + $0x5e0] sm:$0xff] %vm2640, %v2572
  %2830 = vst.msk [vmem:[%s3 + $0x5e8] sm:$0xff] %vm2640, %v2573
  %2831 = vst.msk [vmem:[%s3 + $0x5f0] sm:$0xff] %vm2640, %v2574
  %2832 = vst.msk [vmem:[%s3 + $0x5f8] sm:$0xff] %vm2640, %v2575
  %2833 = vst.msk [vmem:[%s3 + $0x600] sm:$0xff] %vm2640, %v2576
  %2834 = vst.msk [vmem:[%s3 + $0x608] sm:$0xff] %vm2640, %v2577
  %2835 = vst.msk [vmem:[%s3 + $0x610] sm:$0xff] %vm2640, %v2578
  %2836 = vst.msk [vmem:[%s3 + $0x618] sm:$0xff] %vm2640, %v2579
  %2837 = vst.msk [vmem:[%s3 + $0x620] sm:$0xff] %vm2640, %v2580
  %2838 = vst.msk [vmem:[%s3 + $0x628] sm:$0xff] %vm2640, %v2581
  %2839 = vst.msk [vmem:[%s3 + $0x630] sm:$0xff] %vm2640, %v2582
  %2840 = vst.msk [vmem:[%s3 + $0x638] sm:$0xff] %vm2640, %v2583
  %2841 = vst.msk [vmem:[%s3 + $0x640] sm:$0xff] %vm2640, %v2584
  %2842 = vst.msk [vmem:[%s3 + $0x648] sm:$0xff] %vm2640, %v2585
  %2843 = vst.msk [vmem:[%s3 + $0x650] sm:$0xff] %vm2640, %v2586
  %2844 = vst.msk [vmem:[%s3 + $0x658] sm:$0xff] %vm2640, %v2587
  %2845 = vst.msk [vmem:[%s3 + $0x660] sm:$0xff] %vm2640, %v2588
  %2846 = vst.msk [vmem:[%s3 + $0x668] sm:$0xff] %vm2640, %v2589
  %2847 = vst.msk [vmem:[%s3 + $0x670] sm:$0xff] %vm2640, %v2590
  %2848 = vst.msk [vmem:[%s3 + $0x678] sm:$0xff] %vm2640, %v2591
  %2849 = vst.msk [vmem:[%s3 + $0x680] sm:$0xff] %vm2640, %v2592
  %2850 = vst.msk [vmem:[%s3 + $0x688] sm:$0xff] %vm2640, %v2593
  %2851 = vst.msk [vmem:[%s3 + $0x690] sm:$0xff] %vm2640, %v2594
  %2852 = vst.msk [vmem:[%s3 + $0x698] sm:$0xff] %vm2640, %v2595
  %2853 = vst.msk [vmem:[%s3 + $0x6a0] sm:$0xff] %vm2640, %v2596
  %2854 = vst.msk [vmem:[%s3 + $0x6a8] sm:$0xff] %vm2640, %v2597
  %2855 = vst.msk [vmem:[%s3 + $0x6b0] sm:$0xff] %vm2640, %v2598
  %2856 = vst.msk [vmem:[%s3 + $0x6b8] sm:$0xff] %vm2640, %v2599
  %2857 = vst.msk [vmem:[%s3 + $0x6c0] sm:$0xff] %vm2640, %v2600
  %2858 = vst.msk [vmem:[%s3 + $0x6c8] sm:$0xff] %vm2640, %v2601
  %2859 = vst.msk [vmem:[%s3 + $0x6d0] sm:$0xff] %vm2640, %v2602
  %2860 = vst.msk [vmem:[%s3 + $0x6d8] sm:$0xff] %vm2640, %v2603
  %2861 = vst.msk [vmem:[%s3 + $0x6e0] sm:$0xff] %vm2640, %v2604
  %2862 = vst.msk [vmem:[%s3 + $0x6e8] sm:$0xff] %vm2640, %v2605
  %2863 = vst.msk [vmem:[%s3 + $0x6f0] sm:$0xff] %vm2640, %v2606
  %2864 = vst.msk [vmem:[%s3 + $0x6f8] sm:$0xff] %vm2640, %v2607
  %2865 = vst.msk [vmem:[%s3 + $0x700] sm:$0xff] %vm2640, %v2608
  %2866 = vst.msk [vmem:[%s3 + $0x708] sm:$0xff] %vm2640, %v2609
  %2867 = vst.msk [vmem:[%s3 + $0x710] sm:$0xff] %vm2640, %v2610
  %2868 = vst.msk [vmem:[%s3 + $0x718] sm:$0xff] %vm2640, %v2611
  %2869 = vst.msk [vmem:[%s3 + $0x720] sm:$0xff] %vm2640, %v2612
  %2870 = vst.msk [vmem:[%s3 + $0x728] sm:$0xff] %vm2640, %v2613
  %2871 = vst.msk [vmem:[%s3 + $0x730] sm:$0xff] %vm2640, %v2614
  %2872 = vst.msk [vmem:[%s3 + $0x738] sm:$0xff] %vm2640, %v2615
  %2873 = vst.msk [vmem:[%s3 + $0x740] sm:$0xff] %vm2640, %v2616
  %2874 = vst.msk [vmem:[%s3 + $0x748] sm:$0xff] %vm2640, %v2617
  %2875 = vst.msk [vmem:[%s3 + $0x750] sm:$0xff] %vm2640, %v2618
  %2876 = vst.msk [vmem:[%s3 + $0x758] sm:$0xff] %vm2640, %v2619
  %2877 = vst.msk [vmem:[%s3 + $0x760] sm:$0xff] %vm2640, %v2620
  %2878 = vst.msk [vmem:[%s3 + $0x768] sm:$0xff] %vm2640, %v2621
  %2879 = vst.msk [vmem:[%s3 + $0x770] sm:$0xff] %vm2640, %v2622
  %2880 = vst.msk [vmem:[%s3 + $0x778] sm:$0xff] %vm2640, %v2623
  %2881 = vst.msk [vmem:[%s3 + $0x780] sm:$0xff] %vm2640, %v2624
  %2882 = vst.msk [vmem:[%s3 + $0x788] sm:$0xff] %vm2640, %v2625
  %2883 = vst.msk [vmem:[%s3 + $0x790] sm:$0xff] %vm2640, %v2626
  %2884 = vst.msk [vmem:[%s3 + $0x798] sm:$0xff] %vm2640, %v2627
  %2885 = vst.msk [vmem:[%s3 + $0x7a0] sm:$0xff] %vm2640, %v2628
  %2886 = vst.msk [vmem:[%s3 + $0x7a8] sm:$0xff] %vm2640, %v2629
  %2887 = vst.msk [vmem:[%s3 + $0x7b0] sm:$0xff] %vm2640, %v2630
  %2888 = vst.msk [vmem:[%s3 + $0x7b8] sm:$0xff] %vm2640, %v2631
  %2889 = vst.msk [vmem:[%s3 + $0x7c0] sm:$0xff] %vm2640, %v2632
  %2890 = vst.msk [vmem:[%s3 + $0x7c8] sm:$0xff] %vm2640, %v2633
  %2891 = vst.msk [vmem:[%s3 + $0x7d0] sm:$0xff] %vm2640, %v2634
  %2892 = vst.msk [vmem:[%s3 + $0x7d8] sm:$0xff] %vm2640, %v2635
  %2893 = vst.msk [vmem:[%s3 + $0x7e0] sm:$0xff] %vm2640, %v2636
  %2894 = vst.msk [vmem:[%s3 + $0x7e8] sm:$0xff] %vm2640, %v2637
  %2895 = vst.msk [vmem:[%s3 + $0x7f0] sm:$0xff] %vm2640, %v2638
  %2896 = vst.msk [vmem:[%s3 + $0x7f8] sm:$0xff] %vm2640, %v2639
  // Predicated region
  $region14: #{encoder_forward.5} parent=0 // pred_check
    _
  $region15: #{encoder_forward.5} parent=0 // pred_check_branch
    %2898 = sbr.rel (0) target = $region17
  $region16: #{encoder_forward.5} parent=0 // pred_region
    _
  $region17: #{encoder_forward.5} parent=0 // pred_fallthru
    _
  // Predicated region
  $region18: #{encoder_forward.5} parent=0 // pred_check
    _
  $region19: #{encoder_forward.5} parent=0 // pred_check_branch
    %2900 = sbr.rel (0) target = $region21
  $region20: #{encoder_forward.5} parent=0 // pred_region
    _
  $region21: #{encoder_forward.5} parent=0 // pred_fallthru
    _

// kernel: encoder_forward.7
$region0: #{encoder_forward.7}
  #allocation0 [shape = 'u32[]', space=smem, size = 0x4, offset = 0x4, fixed_abs, tag = 'smem constant byte address 0x4 - core index']
  #allocation1 [shape = 'u32[144,128]{1,0:T(1,128)}', space=vmem, size = 0x12000, scoped, tag = 'internal scratch']
  %s0 = inlined_call_operand.vmem [shape: f32[4,2,9,9,64], index: 0, kind: input, shape index: {}]
  %s1 = inlined_call_operand.vmem [shape: bf16[9,64,128], index: 1, kind: input, shape index: {}]
  %s2 = inlined_call_operand.vmem [shape: f32[1,128], index: 2, kind: input, shape index: {}]
  %s3 = inlined_call_operand.vmem [shape: f32[128,128], index: 3, kind: output, shape index: {}]
  %s4 = sld [smem:[#allocation0]]
  $region22: #{encoder_forward.7} parent=0
    _
  %s6 = ssub.s32 1, %s4
  %s7 = scalar_select 0, %s6, %s4
  // Predicated region
  $region2: #{encoder_forward.7} parent=0 // pred_check
    _
  $region3: #{encoder_forward.7} parent=0 // pred_check_branch
    %9 = sbr.rel (0) target = $region5
  $region4: #{encoder_forward.7} parent=0 // pred_region
    _
  $region5: #{encoder_forward.7} parent=0 // pred_fallthru
    _
  // Predicated region
  $region6: #{encoder_forward.7} parent=0 // pred_check
    _
  $region7: #{encoder_forward.7} parent=0 // pred_check_branch
    %11 = sbr.rel (0) target = $region9
  $region8: #{encoder_forward.7} parent=0 // pred_region
    _
  $region9: #{encoder_forward.7} parent=0 // pred_fallthru
    _
  // Predicated region
  $region10: #{encoder_forward.7} parent=0 // pred_check
    _
  $region11: #{encoder_forward.7} parent=0 // pred_check_branch
    %13 = sbr.rel (0) target = $region13
  $region12: #{encoder_forward.7} parent=0 // pred_region
    _
  $region13: #{encoder_forward.7} parent=0 // pred_fallthru
    _
  %v15 = vld [vmem:[%s0] sm:$0xff]
  %v16 = vld [vmem:[%s0 + $0x10] sm:$0xff]
  %v17 = vld [vmem:[%s0 + $0x20] sm:$0xff]
  %v18 = vld [vmem:[%s0 + $0x30] sm:$0xff]
  %v19 = vld [vmem:[%s0 + $0x40] sm:$0xff]
  %v20 = vld [vmem:[%s0 + $0x50] sm:$0xff]
  %v21 = vld [vmem:[%s0 + $0x60] sm:$0xff]
  %v22 = vld [vmem:[%s0 + $0x70] sm:$0xff]
  %v23 = vld [vmem:[%s0 + $0x90] sm:$0xff]
  %v24 = vld [vmem:[%s0 + $0xa0] sm:$0xff]
  %v25 = vld [vmem:[%s0 + $0xb0] sm:$0xff]
  %v26 = vld [vmem:[%s0 + $0xc0] sm:$0xff]
  %v27 = vld [vmem:[%s0 + $0xd0] sm:$0xff]
  %v28 = vld [vmem:[%s0 + $0xe0] sm:$0xff]
  %v29 = vld [vmem:[%s0 + $0xf0] sm:$0xff]
  %v30 = vld [vmem:[%s0 + $0x100] sm:$0xff]
  %v31 = vpack.c.bf16 %v16, %v15
  %v32 = vpack.c.bf16 %v18, %v17
  %v33 = vpack.c.bf16 %v20, %v19
  %v34 = vpack.c.bf16 %v22, %v21
  %v35 = vpack.c.bf16 %v24, %v23
  %v36 = vpack.c.bf16 %v26, %v25
  %v37 = vpack.c.bf16 %v28, %v27
  %v38 = vpack.c.bf16 %v30, %v29
  %v39 = vld [vmem:[%s1] sm:$0xf]
  %v40 = vld [vmem:[%s1 + $0x4] sm:$0xf]
  %v41 = vld [vmem:[%s1 + $0x8] sm:$0xf]
  %v42 = vld [vmem:[%s1 + $0xc] sm:$0xf]
  %v43 = vld [vmem:[%s1 + $0x10] sm:$0xf]
  %v44 = vld [vmem:[%s1 + $0x14] sm:$0xf]
  %v45 = vld [vmem:[%s1 + $0x18] sm:$0xf]
  %v46 = vld [vmem:[%s1 + $0x1c] sm:$0xf]
  %s47 = scalar_lea.vmem %s0, 288
  %v48 = vld [vmem:[%s47] sm:$0xff]
  %v49 = vld [vmem:[%s47 + $0x10] sm:$0xff]
  %v50 = vld [vmem:[%s47 + $0x20] sm:$0xff]
  %v51 = vld [vmem:[%s47 + $0x30] sm:$0xff]
  %v52 = vld [vmem:[%s47 + $0x40] sm:$0xff]
  %v53 = vld [vmem:[%s47 + $0x50] sm:$0xff]
  %v54 = vld [vmem:[%s47 + $0x60] sm:$0xff]
  %v55 = vld [vmem:[%s47 + $0x70] sm:$0xff]
  %v56 = vld [vmem:[%s47 + $0x90] sm:$0xff]
  %v57 = vld [vmem:[%s47 + $0xa0] sm:$0xff]
  %v58 = vld [vmem:[%s47 + $0xb0] sm:$0xff]
  %v59 = vld [vmem:[%s47 + $0xc0] sm:$0xff]
  %v60 = vld [vmem:[%s47 + $0xd0] sm:$0xff]
  %v61 = vld [vmem:[%s47 + $0xe0] sm:$0xff]
  %v62 = vld [vmem:[%s47 + $0xf0] sm:$0xff]
  %v63 = vld [vmem:[%s47 + $0x100] sm:$0xff]
  %v64 = vpack.c.bf16 %v49, %v48
  %v65 = vpack.c.bf16 %v51, %v50
  %v66 = vpack.c.bf16 %v53, %v52
  %v67 = vpack.c.bf16 %v55, %v54
  %v68 = vpack.c.bf16 %v57, %v56
  %v69 = vpack.c.bf16 %v59, %v58
  %v70 = vpack.c.bf16 %v61, %v60
  %v71 = vpack.c.bf16 %v63, %v62
  %s72 = scalar_lea.vmem %s1, 32
  %v73 = vld [vmem:[%s72] sm:$0xf]
  %v74 = vld [vmem:[%s72 + $0x4] sm:$0xf]
  %v75 = vld [vmem:[%s72 + $0x8] sm:$0xf]
  %v76 = vld [vmem:[%s72 + $0xc] sm:$0xf]
  %v77 = vld [vmem:[%s72 + $0x10] sm:$0xf]
  %v78 = vld [vmem:[%s72 + $0x14] sm:$0xf]
  %v79 = vld [vmem:[%s72 + $0x18] sm:$0xf]
  %v80 = vld [vmem:[%s72 + $0x1c] sm:$0xf]
  %v89 = vunpack.c.l.b16 %v73
  %v90 = vunpack.c.l.b16 %v74
  %v91 = vunpack.c.l.b16 %v75
  %v92 = vunpack.c.l.b16 %v76
  %v93 = vunpack.c.l.b16 %v77
  %v94 = vunpack.c.l.b16 %v78
  %v95 = vunpack.c.l.b16 %v79
  %v96 = vunpack.c.l.b16 %v80
  %v97 = vpack.c.b16 %v90, %v89
  %v98 = vpack.c.b16 %v92, %v91
  %v99 = vpack.c.b16 %v94, %v93
  %v100 = vpack.c.b16 %v96, %v95
  %vm105 = vcmask 523264
  %v107 = vsel %vm105, %v64, 0
  %v110 = vsel %vm105, %v65, 0
  %v113 = vsel %vm105, %v66, 0
  %v116 = vsel %vm105, %v67, 0
  %v119 = vsel %vm105, %v68, 0
  %v122 = vsel %vm105, %v69, 0
  %v125 = vsel %vm105, %v70, 0
  %v128 = vsel %vm105, %v71, 0
  %130 = vmatprep.subr.bf16.mxu0 0
  %131 = vmatpush1.bf16.msra.mxu0 %v97
  %132 = vmatprep.subr.bf16.mxu0 0
  %133 = vmatpush1.bf16.msra.mxu0 %v98
  %134 = vmatprep.subr.bf16.mxu0 0
  %135 = vmatpush1.bf16.msra.mxu0 %v99
  %136 = vmatprep.subr.bf16.mxu0 0
  %137 = vmatpush1.bf16.msra.mxu0 %v100
  %138 = vmatprep.subr.bf16.mxu0 0
  %139 = vmatpush1.bf16.msra.mxu0 0
  %140 = vmatprep.subr.bf16.mxu0 0
  %141 = vmatpush1.bf16.msra.mxu0 0
  %142 = vmatprep.subr.bf16.mxu0 0
  %143 = vmatpush1.bf16.msra.mxu0 0
  %144 = vmatprep.subr.bf16.mxu0 0
  %145 = vmatpush1.bf16.msra.mxu0 0
  %146 = vmatprep.subr.bf16.mxu0 0
  %147 = vmatpush1.bf16.msra.mxu0 0
  %148 = vmatprep.subr.bf16.mxu0 0
  %149 = vmatpush1.bf16.msra.mxu0 0
  %150 = vmatprep.subr.bf16.mxu0 0
  %151 = vmatpush1.bf16.msra.mxu0 0
  %152 = vmatprep.subr.bf16.mxu0 0
  %153 = vmatpush1.bf16.msra.mxu0 0
  %154 = vmatprep.subr.bf16.mxu0 0
  %155 = vmatpush1.bf16.msra.mxu0 0
  %156 = vmatprep.subr.bf16.mxu0 0
  %157 = vmatpush1.bf16.msra.mxu0 0
  %158 = vmatprep.subr.bf16.mxu0 0
  %159 = vmatpush1.bf16.msra.mxu0 0
  %160 = vmatprep.subr.bf16.mxu0 0
  %161 = vmatpush1.bf16.msra.mxu0 0
  %162 = vmatprep.mubr.bf16.mxu0 0
  %163 = vmatmul.mubr.bf16.gmra.mrb[0].mxu0 %v107
  %v164 = vpop.f32.mrb[0].mxu0
  %v165 = vadd.f32 0.0, %v164
  %v166 = vpop.f32.mrb[0].mxu0
  %v167 = vpop.f32.mrb[0].mxu0
  %v168 = vadd.f32 0.0, %v167
  %v169 = vpop.f32.mrb[0].mxu0
  %170 = vmatprep.mubr.bf16.mxu0 0
  %171 = vmatmul.mubr.bf16.gmra.mrb[0].mxu0 %v110
  %v172 = vpop.f32.mrb[0].mxu0
  %v173 = vadd.f32 0.0, %v172
  %v174 = vpop.f32.mrb[0].mxu0
  %v175 = vpop.f32.mrb[0].mxu0
  %v176 = vadd.f32 0.0, %v175
  %v177 = vpop.f32.mrb[0].mxu0
  %178 = vmatprep.mubr.bf16.mxu0 0
  %179 = vmatmul.mubr.bf16.gmra.mrb[0].mxu0 %v113
  %v180 = vpop.f32.mrb[0].mxu0
  %v181 = vadd.f32 0.0, %v180
  %v182 = vpop.f32.mrb[0].mxu0
  %v183 = vpop.f32.mrb[0].mxu0
  %v184 = vadd.f32 0.0, %v183
  %v185 = vpop.f32.mrb[0].mxu0
  %186 = vmatprep.mubr.bf16.mxu0 0
  %187 = vmatmul.mubr.bf16.gmra.mrb[0].mxu0 %v116
  %v188 = vpop.f32.mrb[0].mxu0
  %v189 = vadd.f32 0.0, %v188
  %v190 = vpop.f32.mrb[0].mxu0
  %v191 = vpop.f32.mrb[0].mxu0
  %v192 = vadd.f32 0.0, %v191
  %v193 = vpop.f32.mrb[0].mxu0
  %194 = vmatprep.mubr.bf16.mxu0 0
  %195 = vmatmul.mubr.bf16.gmra.mrb[0].mxu0 %v119
  %v196 = vpop.f32.mrb[0].mxu0
  %v197 = vadd.f32 0.0, %v196
  %v198 = vpop.f32.mrb[0].mxu0
  %v199 = vpop.f32.mrb[0].mxu0
  %v200 = vadd.f32 0.0, %v199
  %v201 = vpop.f32.mrb[0].mxu0
  %202 = vmatprep.mubr.bf16.mxu0 0
  %203 = vmatmul.mubr.bf16.gmra.mrb[0].mxu0 %v122
  %v204 = vpop.f32.mrb[0].mxu0
  %v205 = vadd.f32 0.0, %v204
  %v206 = vpop.f32.mrb[0].mxu0
  %v207 = vpop.f32.mrb[0].mxu0
  %v208 = vadd.f32 0.0, %v207
  %v209 = vpop.f32.mrb[0].mxu0
  %210 = vmatprep.mubr.bf16.mxu0 0
  %211 = vmatmul.mubr.bf16.gmra.mrb[0].mxu0 %v125
  %v212 = vpop.f32.mrb[0].mxu0
  %v213 = vadd.f32 0.0, %v212
  %v214 = vpop.f32.mrb[0].mxu0
  %v215 = vpop.f32.mrb[0].mxu0
  %v216 = vadd.f32 0.0, %v215
  %v217 = vpop.f32.mrb[0].mxu0
  %218 = vmatprep.mubr.bf16.mxu0 0
  %219 = vmatmul.mubr.bf16.gmra.mrb[0].mxu0 %v128
  %v220 = vpop.f32.mrb[0].mxu0
  %v221 = vadd.f32 0.0, %v220
  %v222 = vpop.f32.mrb[0].mxu0
  %v223 = vpop.f32.mrb[0].mxu0
  %v224 = vadd.f32 0.0, %v223
  %v225 = vpop.f32.mrb[0].mxu0
  %226 = vdwg.mxu0
  %v235 = vunpack.c.l.b16 %v39
  %v236 = vunpack.c.l.b16 %v40
  %v237 = vunpack.c.l.b16 %v41
  %v238 = vunpack.c.l.b16 %v42
  %v239 = vunpack.c.l.b16 %v43
  %v240 = vunpack.c.l.b16 %v44
  %v241 = vunpack.c.l.b16 %v45
  %v242 = vunpack.c.l.b16 %v46
  %v243 = vpack.c.b16 %v236, %v235
  %v244 = vpack.c.b16 %v238, %v237
  %v245 = vpack.c.b16 %v240, %v239
  %v246 = vpack.c.b16 %v242, %v241
  %v252 = vsel %vm105, %v31, 0
  %v255 = vsel %vm105, %v32, 0
  %v258 = vsel %vm105, %v33, 0
  %v261 = vsel %vm105, %v34, 0
  %v264 = vsel %vm105, %v35, 0
  %v267 = vsel %vm105, %v36, 0
  %v270 = vsel %vm105, %v37, 0
  %v273 = vsel %vm105, %v38, 0
  %275 = vmatprep.subr.bf16.mxu0 0
  %276 = vmatpush1.bf16.msra.mxu0 %v243
  %277 = vmatprep.subr.bf16.mxu0 0
  %278 = vmatpush1.bf16.msra.mxu0 %v244
  %279 = vmatprep.subr.bf16.mxu0 0
  %280 = vmatpush1.bf16.msra.mxu0 %v245
  %281 = vmatprep.subr.bf16.mxu0 0
  %282 = vmatpush1.bf16.msra.mxu0 %v246
  %283 = vmatprep.subr.bf16.mxu0 0
  %284 = vmatpush1.bf16.msra.mxu0 0
  %285 = vmatprep.subr.bf16.mxu0 0
  %286 = vmatpush1.bf16.msra.mxu0 0
  %287 = vmatprep.subr.bf16.mxu0 0
  %288 = vmatpush1.bf16.msra.mxu0 0
  %289 = vmatprep.subr.bf16.mxu0 0
  %290 = vmatpush1.bf16.msra.mxu0 0
  %291 = vmatprep.subr.bf16.mxu0 0
  %292 = vmatpush1.bf16.msra.mxu0 0
  %293 = vmatprep.subr.bf16.mxu0 0
  %294 = vmatpush1.bf16.msra.mxu0 0
  %295 = vmatprep.subr.bf16.mxu0 0
  %296 = vmatpush1.bf16.msra.mxu0 0
  %297 = vmatprep.subr.bf16.mxu0 0
  %298 = vmatpush1.bf16.msra.mxu0 0
  %299 = vmatprep.subr.bf16.mxu0 0
  %300 = vmatpush1.bf16.msra.mxu0 0
  %301 = vmatprep.subr.bf16.mxu0 0
  %302 = vmatpush1.bf16.msra.mxu0 0
  %303 = vmatprep.subr.bf16.mxu0 0
  %304 = vmatpush1.bf16.msra.mxu0 0
  %305 = vmatprep.subr.bf16.mxu0 0
  %306 = vmatpush1.bf16.msra.mxu0 0
  %307 = vmatprep.mubr.bf16.mxu0 0
  %308 = vmatmul.mubr.bf16.gmra.mrb[0].mxu0 %v252
  %v309 = vpop.f32.mrb[0].mxu0
  %v310 = vadd.f32 %v165, %v309
  %v311 = vpop.f32.mrb[0].mxu0
  %v312 = vpop.f32.mrb[0].mxu0
  %v313 = vadd.f32 %v168, %v312
  %v314 = vpop.f32.mrb[0].mxu0
  %315 = vmatprep.mubr.bf16.mxu0 0
  %316 = vmatmul.mubr.bf16.gmra.mrb[0].mxu0 %v255
  %v317 = vpop.f32.mrb[0].mxu0
  %v318 = vadd.f32 %v173, %v317
  %v319 = vpop.f32.mrb[0].mxu0
  %v320 = vpop.f32.mrb[0].mxu0
  %v321 = vadd.f32 %v176, %v320
  %v322 = vpop.f32.mrb[0].mxu0
  %323 = vmatprep.mubr.bf16.mxu0 0
  %324 = vmatmul.mubr.bf16.gmra.mrb[0].mxu0 %v258
  %v325 = vpop.f32.mrb[0].mxu0
  %v326 = vadd.f32 %v181, %v325
  %v327 = vpop.f32.mrb[0].mxu0
  %v328 = vpop.f32.mrb[0].mxu0
  %v329 = vadd.f32 %v184, %v328
  %v330 = vpop.f32.mrb[0].mxu0
  %331 = vmatprep.mubr.bf16.mxu0 0
  %332 = vmatmul.mubr.bf16.gmra.mrb[0].mxu0 %v261
  %v333 = vpop.f32.mrb[0].mxu0
  %v334 = vadd.f32 %v189, %v333
  %v335 = vpop.f32.mrb[0].mxu0
  %v336 = vpop.f32.mrb[0].mxu0
  %v337 = vadd.f32 %v192, %v336
  %v338 = vpop.f32.mrb[0].mxu0
  %339 = vmatprep.mubr.bf16.mxu0 0
  %340 = vmatmul.mubr.bf16.gmra.mrb[0].mxu0 %v264
  %v341 = vpop.f32.mrb[0].mxu0
  %v342 = vadd.f32 %v197, %v341
  %v343 = vpop.f32.mrb[0].mxu0
  %v344 = vpop.f32.mrb[0].mxu0
  %v345 = vadd.f32 %v200, %v344
  %v346 = vpop.f32.mrb[0].mxu0
  %347 = vmatprep.mubr.bf16.mxu0 0
  %348 = vmatmul.mubr.bf16.gmra.mrb[0].mxu0 %v267
  %v349 = vpop.f32.mrb[0].mxu0
  %v350 = vadd.f32 %v205, %v349
  %v351 = vpop.f32.mrb[0].mxu0
  %v352 = vpop.f32.mrb[0].mxu0
  %v353 = vadd.f32 %v208, %v352
  %v354 = vpop.f32.mrb[0].mxu0
  %355 = vmatprep.mubr.bf16.mxu0 0
  %356 = vmatmul.mubr.bf16.gmra.mrb[0].mxu0 %v270
  %v357 = vpop.f32.mrb[0].mxu0
  %v358 = vadd.f32 %v213, %v357
  %v359 = vpop.f32.mrb[0].mxu0
  %v360 = vpop.f32.mrb[0].mxu0
  %v361 = vadd.f32 %v216, %v360
  %v362 = vpop.f32.mrb[0].mxu0
  %363 = vmatprep.mubr.bf16.mxu0 0
  %364 = vmatmul.mubr.bf16.gmra.mrb[0].mxu0 %v273
  %v365 = vpop.f32.mrb[0].mxu0
  %v366 = vadd.f32 %v221, %v365
  %v367 = vpop.f32.mrb[0].mxu0
  %v368 = vpop.f32.mrb[0].mxu0
  %v369 = vadd.f32 %v224, %v368
  %v370 = vpop.f32.mrb[0].mxu0
  %371 = vdwg.mxu0
  %v372 = vld [vmem:[%s0 + $0x1] sm:$0xff]
  %v373 = vld [vmem:[%s0 + $0x11] sm:$0xff]
  %v374 = vld [vmem:[%s0 + $0x21] sm:$0xff]
  %v375 = vld [vmem:[%s0 + $0x31] sm:$0xff]
  %v376 = vld [vmem:[%s0 + $0x41] sm:$0xff]
  %v377 = vld [vmem:[%s0 + $0x51] sm:$0xff]
  %v378 = vld [vmem:[%s0 + $0x61] sm:$0xff]
  %v379 = vld [vmem:[%s0 + $0x71] sm:$0xff]
  %v380 = vld [vmem:[%s0 + $0x91] sm:$0xff]
  %v381 = vld [vmem:[%s0 + $0xa1] sm:$0xff]
  %v382 = vld [vmem:[%s0 + $0xb1] sm:$0xff]
  %v383 = vld [vmem:[%s0 + $0xc1] sm:$0xff]
  %v384 = vld [vmem:[%s0 + $0xd1] sm:$0xff]
  %v385 = vld [vmem:[%s0 + $0xe1] sm:$0xff]
  %v386 = vld [vmem:[%s0 + $0xf1] sm:$0xff]
  %v387 = vld [vmem:[%s0 + $0x101] sm:$0xff]
  %v388 = vpack.c.bf16 %v373, %v372
  %v389 = vpack.c.bf16 %v375, %v374
  %v390 = vpack.c.bf16 %v377, %v376
  %v391 = vpack.c.bf16 %v379, %v378
  %v392 = vpack.c.bf16 %v381, %v380
  %v393 = vpack.c.bf16 %v383, %v382
  %v394 = vpack.c.bf16 %v385, %v384
  %v395 = vpack.c.bf16 %v387, %v386
  %s396 = scalar_lea.vmem %s1, 64
  %v397 = vld [vmem:[%s396] sm:$0xf]
  %v398 = vld [vmem:[%s396 + $0x4] sm:$0xf]
  %v399 = vld [vmem:[%s396 + $0x8] sm:$0xf]
  %v400 = vld [vmem:[%s396 + $0xc] sm:$0xf]
  %v401 = vld [vmem:[%s396 + $0x10] sm:$0xf]
  %v402 = vld [vmem:[%s396 + $0x14] sm:$0xf]
  %v403 = vld [vmem:[%s396 + $0x18] sm:$0xf]
  %v404 = vld [vmem:[%s396 + $0x1c] sm:$0xf]
  %v413 = vunpack.c.l.b16 %v397
  %v414 = vunpack.c.l.b16 %v398
  %v415 = vunpack.c.l.b16 %v399
  %v416 = vunpack.c.l.b16 %v400
  %v417 = vunpack.c.l.b16 %v401
  %v418 = vunpack.c.l.b16 %v402
  %v419 = vunpack.c.l.b16 %v403
  %v420 = vunpack.c.l.b16 %v404
  %v421 = vpack.c.b16 %v414, %v413
  %v422 = vpack.c.b16 %v416, %v415
  %v423 = vpack.c.b16 %v418, %v417
  %v424 = vpack.c.b16 %v420, %v419
  %v430 = vsel %vm105, %v388, 0
  %v433 = vsel %vm105, %v389, 0
  %v436 = vsel %vm105, %v390, 0
  %v439 = vsel %vm105, %v391, 0
  %v442 = vsel %vm105, %v392, 0
  %v445 = vsel %vm105, %v393, 0
  %v448 = vsel %vm105, %v394, 0
  %v451 = vsel %vm105, %v395, 0
  %453 = vmatprep.subr.bf16.mxu0 0
  %454 = vmatpush1.bf16.msra.mxu0 %v421
  %455 = vmatprep.subr.bf16.mxu0 0
  %456 = vmatpush1.bf16.msra.mxu0 %v422
  %457 = vmatprep.subr.bf16.mxu0 0
  %458 = vmatpush1.bf16.msra.mxu0 %v423
  %459 = vmatprep.subr.bf16.mxu0 0
  %460 = vmatpush1.bf16.msra.mxu0 %v424
  %461 = vmatprep.subr.bf16.mxu0 0
  %462 = vmatpush1.bf16.msra.mxu0 0
  %463 = vmatprep.subr.bf16.mxu0 0
  %464 = vmatpush1.bf16.msra.mxu0 0
  %465 = vmatprep.subr.bf16.mxu0 0
  %466 = vmatpush1.bf16.msra.mxu0 0
  %467 = vmatprep.subr.bf16.mxu0 0
  %468 = vmatpush1.bf16.msra.mxu0 0
  %469 = vmatprep.subr.bf16.mxu0 0
  %470 = vmatpush1.bf16.msra.mxu0 0
  %471 = vmatprep.subr.bf16.mxu0 0
  %472 = vmatpush1.bf16.msra.mxu0 0
  %473 = vmatprep.subr.bf16.mxu0 0
  %474 = vmatpush1.bf16.msra.mxu0 0
  %475 = vmatprep.subr.bf16.mxu0 0
  %476 = vmatpush1.bf16.msra.mxu0 0
  %477 = vmatprep.subr.bf16.mxu0 0
  %478 = vmatpush1.bf16.msra.mxu0 0
  %479 = vmatprep.subr.bf16.mxu0 0
  %480 = vmatpush1.bf16.msra.mxu0 0
  %481 = vmatprep.subr.bf16.mxu0 0
  %482 = vmatpush1.bf16.msra.mxu0 0
  %483 = vmatprep.subr.bf16.mxu0 0
  %484 = vmatpush1.bf16.msra.mxu0 0
  %485 = vmatprep.mubr.bf16.mxu0 0
  %486 = vmatmul.mubr.bf16.gmra.mrb[0].mxu0 %v430
  %v487 = vpop.f32.mrb[0].mxu0
  %v488 = vadd.f32 0.0, %v487
  %v489 = vpop.f32.mrb[0].mxu0
  %v490 = vpop.f32.mrb[0].mxu0
  %v491 = vadd.f32 0.0, %v490
  %v492 = vpop.f32.mrb[0].mxu0
  %493 = vmatprep.mubr.bf16.mxu0 0
  %494 = vmatmul.mubr.bf16.gmra.mrb[0].mxu0 %v433
  %v495 = vpop.f32.mrb[0].mxu0
  %v496 = vadd.f32 0.0, %v495
  %v497 = vpop.f32.mrb[0].mxu0
  %v498 = vpop.f32.mrb[0].mxu0
  %v499 = vadd.f32 0.0, %v498
  %v500 = vpop.f32.mrb[0].mxu0
  %501 = vmatprep.mubr.bf16.mxu0 0
  %502 = vmatmul.mubr.bf16.gmra.mrb[0].mxu0 %v436
  %v503 = vpop.f32.mrb[0].mxu0
  %v504 = vadd.f32 0.0, %v503
  %v505 = vpop.f32.mrb[0].mxu0
  %v506 = vpop.f32.mrb[0].mxu0
  %v507 = vadd.f32 0.0, %v506
  %v508 = vpop.f32.mrb[0].mxu0
  %509 = vmatprep.mubr.bf16.mxu0 0
  %510 = vmatmul.mubr.bf16.gmra.mrb[0].mxu0 %v439
  %v511 = vpop.f32.mrb[0].mxu0
  %v512 = vadd.f32 0.0, %v511
  %v513 = vpop.f32.mrb[0].mxu0
  %v514 = vpop.f32.mrb[0].mxu0
  %v515 = vadd.f32 0.0, %v514
  %v516 = vpop.f32.mrb[0].mxu0
  %517 = vmatprep.mubr.bf16.mxu0 0
  %518 = vmatmul.mubr.bf16.gmra.mrb[0].mxu0 %v442
  %v519 = vpop.f32.mrb[0].mxu0
  %v520 = vadd.f32 0.0, %v519
  %v521 = vpop.f32.mrb[0].mxu0
  %v522 = vpop.f32.mrb[0].mxu0
  %v523 = vadd.f32 0.0, %v522
  %v524 = vpop.f32.mrb[0].mxu0
  %525 = vmatprep.mubr.bf16.mxu0 0
  %526 = vmatmul.mubr.bf16.gmra.mrb[0].mxu0 %v445
  %v527 = vpop.f32.mrb[0].mxu0
  %v528 = vadd.f32 0.0, %v527
  %v529 = vpop.f32.mrb[0].mxu0
  %v530 = vpop.f32.mrb[0].mxu0
  %v531 = vadd.f32 0.0, %v530
  %v532 = vpop.f32.mrb[0].mxu0
  %533 = vmatprep.mubr.bf16.mxu0 0
  %534 = vmatmul.mubr.bf16.gmra.mrb[0].mxu0 %v448
  %v535 = vpop.f32.mrb[0].mxu0
  %v536 = vadd.f32 0.0, %v535
  %v537 = vpop.f32.mrb[0].mxu0
  %v538 = vpop.f32.mrb[0].mxu0
  %v539 = vadd.f32 0.0, %v538
  %v540 = vpop.f32.mrb[0].mxu0
  %541 = vmatprep.mubr.bf16.mxu0 0
  %542 = vmatmul.mubr.bf16.gmra.mrb[0].mxu0 %v451
  %v543 = vpop.f32.mrb[0].mxu0
  %v544 = vadd.f32 0.0, %v543
  %v545 = vpop.f32.mrb[0].mxu0
  %v546 = vpop.f32.mrb[0].mxu0
  %v547 = vadd.f32 0.0, %v546
  %v548 = vpop.f32.mrb[0].mxu0
  %549 = vdwg.mxu0
  %v550 = vadd.f32 %v310, %v488
  %v551 = vadd.f32 %v313, %v491
  %v552 = vadd.f32 %v318, %v496
  %v553 = vadd.f32 %v321, %v499
  %v554 = vadd.f32 %v326, %v504
  %v555 = vadd.f32 %v329, %v507
  %v556 = vadd.f32 %v334, %v512
  %v557 = vadd.f32 %v337, %v515
  %v558 = vadd.f32 %v342, %v520
  %v559 = vadd.f32 %v345, %v523
  %v560 = vadd.f32 %v350, %v528
  %v561 = vadd.f32 %v353, %v531
  %v562 = vadd.f32 %v358, %v536
  %v563 = vadd.f32 %v361, %v539
  %v564 = vadd.f32 %v366, %v544
  %v565 = vadd.f32 %v369, %v547
  %s566 = scalar_lea.vmem %s0, 576
  %v567 = vld [vmem:[%s566] sm:$0xff]
  %v568 = vld [vmem:[%s566 + $0x10] sm:$0xff]
  %v569 = vld [vmem:[%s566 + $0x20] sm:$0xff]
  %v570 = vld [vmem:[%s566 + $0x30] sm:$0xff]
  %v571 = vld [vmem:[%s566 + $0x40] sm:$0xff]
  %v572 = vld [vmem:[%s566 + $0x50] sm:$0xff]
  %v573 = vld [vmem:[%s566 + $0x60] sm:$0xff]
  %v574 = vld [vmem:[%s566 + $0x70] sm:$0xff]
  %v575 = vld [vmem:[%s566 + $0x90] sm:$0xff]
  %v576 = vld [vmem:[%s566 + $0xa0] sm:$0xff]
  %v577 = vld [vmem:[%s566 + $0xb0] sm:$0xff]
  %v578 = vld [vmem:[%s566 + $0xc0] sm:$0xff]
  %v579 = vld [vmem:[%s566 + $0xd0] sm:$0xff]
  %v580 = vld [vmem:[%s566 + $0xe0] sm:$0xff]
  %v581 = vld [vmem:[%s566 + $0xf0] sm:$0xff]
  %v582 = vld [vmem:[%s566 + $0x100] sm:$0xff]
  %v583 = vpack.c.bf16 %v568, %v567
  %v584 = vpack.c.bf16 %v570, %v569
  %v585 = vpack.c.bf16 %v572, %v571
  %v586 = vpack.c.bf16 %v574, %v573
  %v587 = vpack.c.bf16 %v576, %v575
  %v588 = vpack.c.bf16 %v578, %v577
  %v589 = vpack.c.bf16 %v580, %v579
  %v590 = vpack.c.bf16 %v582, %v581
  %s591 = scalar_lea.vmem %s1, 96
  %v592 = vld [vmem:[%s591] sm:$0xf]
  %v593 = vld [vmem:[%s591 + $0x4] sm:$0xf]
  %v594 = vld [vmem:[%s591 + $0x8] sm:$0xf]
  %v595 = vld [vmem:[%s591 + $0xc] sm:$0xf]
  %v596 = vld [vmem:[%s591 + $0x10] sm:$0xf]
  %v597 = vld [vmem:[%s591 + $0x14] sm:$0xf]
  %v598 = vld [vmem:[%s591 + $0x18] sm:$0xf]
  %v599 = vld [vmem:[%s591 + $0x1c] sm:$0xf]
  %v608 = vunpack.c.l.b16 %v592
  %v609 = vunpack.c.l.b16 %v593
  %v610 = vunpack.c.l.b16 %v594
  %v611 = vunpack.c.l.b16 %v595
  %v612 = vunpack.c.l.b16 %v596
  %v613 = vunpack.c.l.b16 %v597
  %v614 = vunpack.c.l.b16 %v598
  %v615 = vunpack.c.l.b16 %v599
  %v616 = vpack.c.b16 %v609, %v608
  %v617 = vpack.c.b16 %v611, %v610
  %v618 = vpack.c.b16 %v613, %v612
  %v619 = vpack.c.b16 %v615, %v614
  %v625 = vsel %vm105, %v583, 0
  %v628 = vsel %vm105, %v584, 0
  %v631 = vsel %vm105, %v585, 0
  %v634 = vsel %vm105, %v586, 0
  %v637 = vsel %vm105, %v587, 0
  %v640 = vsel %vm105, %v588, 0
  %v643 = vsel %vm105, %v589, 0
  %v646 = vsel %vm105, %v590, 0
  %648 = vmatprep.subr.bf16.mxu0 0
  %649 = vmatpush1.bf16.msra.mxu0 %v616
  %650 = vmatprep.subr.bf16.mxu0 0
  %651 = vmatpush1.bf16.msra.mxu0 %v617
  %652 = vmatprep.subr.bf16.mxu0 0
  %653 = vmatpush1.bf16.msra.mxu0 %v618
  %654 = vmatprep.subr.bf16.mxu0 0
  %655 = vmatpush1.bf16.msra.mxu0 %v619
  %656 = vmatprep.subr.bf16.mxu0 0
  %657 = vmatpush1.bf16.msra.mxu0 0
  %658 = vmatprep.subr.bf16.mxu0 0
  %659 = vmatpush1.bf16.msra.mxu0 0
  %660 = vmatprep.subr.bf16.mxu0 0
  %661 = vmatpush1.bf16.msra.mxu0 0
  %662 = vmatprep.subr.bf16.mxu0 0
  %663 = vmatpush1.bf16.msra.mxu0 0
  %664 = vmatprep.subr.bf16.mxu0 0
  %665 = vmatpush1.bf16.msra.mxu0 0
  %666 = vmatprep.subr.bf16.mxu0 0
  %667 = vmatpush1.bf16.msra.mxu0 0
  %668 = vmatprep.subr.bf16.mxu0 0
  %669 = vmatpush1.bf16.msra.mxu0 0
  %670 = vmatprep.subr.bf16.mxu0 0
  %671 = vmatpush1.bf16.msra.mxu0 0
  %672 = vmatprep.subr.bf16.mxu0 0
  %673 = vmatpush1.bf16.msra.mxu0 0
  %674 = vmatprep.subr.bf16.mxu0 0
  %675 = vmatpush1.bf16.msra.mxu0 0
  %676 = vmatprep.subr.bf16.mxu0 0
  %677 = vmatpush1.bf16.msra.mxu0 0
  %678 = vmatprep.subr.bf16.mxu0 0
  %679 = vmatpush1.bf16.msra.mxu0 0
  %680 = vmatprep.mubr.bf16.mxu0 0
  %681 = vmatmul.mubr.bf16.gmra.mrb[0].mxu0 %v625
  %v682 = vpop.f32.mrb[0].mxu0
  %v683 = vadd.f32 0.0, %v682
  %v684 = vpop.f32.mrb[0].mxu0
  %v685 = vpop.f32.mrb[0].mxu0
  %v686 = vadd.f32 0.0, %v685
  %v687 = vpop.f32.mrb[0].mxu0
  %688 = vmatprep.mubr.bf16.mxu0 0
  %689 = vmatmul.mubr.bf16.gmra.mrb[0].mxu0 %v628
  %v690 = vpop.f32.mrb[0].mxu0
  %v691 = vadd.f32 0.0, %v690
  %v692 = vpop.f32.mrb[0].mxu0
  %v693 = vpop.f32.mrb[0].mxu0
  %v694 = vadd.f32 0.0, %v693
  %v695 = vpop.f32.mrb[0].mxu0
  %696 = vmatprep.mubr.bf16.mxu0 0
  %697 = vmatmul.mubr.bf16.gmra.mrb[0].mxu0 %v631
  %v698 = vpop.f32.mrb[0].mxu0
  %v699 = vadd.f32 0.0, %v698
  %v700 = vpop.f32.mrb[0].mxu0
  %v701 = vpop.f32.mrb[0].mxu0
  %v702 = vadd.f32 0.0, %v701
  %v703 = vpop.f32.mrb[0].mxu0
  %704 = vmatprep.mubr.bf16.mxu0 0
  %705 = vmatmul.mubr.bf16.gmra.mrb[0].mxu0 %v634
  %v706 = vpop.f32.mrb[0].mxu0
  %v707 = vadd.f32 0.0, %v706
  %v708 = vpop.f32.mrb[0].mxu0
  %v709 = vpop.f32.mrb[0].mxu0
  %v710 = vadd.f32 0.0, %v709
  %v711 = vpop.f32.mrb[0].mxu0
  %712 = vmatprep.mubr.bf16.mxu0 0
  %713 = vmatmul.mubr.bf16.gmra.mrb[0].mxu0 %v637
  %v714 = vpop.f32.mrb[0].mxu0
  %v715 = vadd.f32 0.0, %v714
  %v716 = vpop.f32.mrb[0].mxu0
  %v717 = vpop.f32.mrb[0].mxu0
  %v718 = vadd.f32 0.0, %v717
  %v719 = vpop.f32.mrb[0].mxu0
  %720 = vmatprep.mubr.bf16.mxu0 0
  %721 = vmatmul.mubr.bf16.gmra.mrb[0].mxu0 %v640
  %v722 = vpop.f32.mrb[0].mxu0
  %v723 = vadd.f32 0.0, %v722
  %v724 = vpop.f32.mrb[0].mxu0
  %v725 = vpop.f32.mrb[0].mxu0
  %v726 = vadd.f32 0.0, %v725
  %v727 = vpop.f32.mrb[0].mxu0
  %728 = vmatprep.mubr.bf16.mxu0 0
  %729 = vmatmul.mubr.bf16.gmra.mrb[0].mxu0 %v643
  %v730 = vpop.f32.mrb[0].mxu0
  %v731 = vadd.f32 0.0, %v730
  %v732 = vpop.f32.mrb[0].mxu0
  %v733 = vpop.f32.mrb[0].mxu0
  %v734 = vadd.f32 0.0, %v733
  %v735 = vpop.f32.mrb[0].mxu0
  %736 = vmatprep.mubr.bf16.mxu0 0
  %737 = vmatmul.mubr.bf16.gmra.mrb[0].mxu0 %v646
  %v738 = vpop.f32.mrb[0].mxu0
  %v739 = vadd.f32 0.0, %v738
  %v740 = vpop.f32.mrb[0].mxu0
  %v741 = vpop.f32.mrb[0].mxu0
  %v742 = vadd.f32 0.0, %v741
  %v743 = vpop.f32.mrb[0].mxu0
  %744 = vdwg.mxu0
  %v745 = vadd.f32 %v550, %v683
  %v746 = vadd.f32 %v551, %v686
  %v747 = vadd.f32 %v552, %v691
  %v748 = vadd.f32 %v553, %v694
  %v749 = vadd.f32 %v554, %v699
  %v750 = vadd.f32 %v555, %v702
  %v751 = vadd.f32 %v556, %v707
  %v752 = vadd.f32 %v557, %v710
  %v753 = vadd.f32 %v558, %v715
  %v754 = vadd.f32 %v559, %v718
  %v755 = vadd.f32 %v560, %v723
  %v756 = vadd.f32 %v561, %v726
  %v757 = vadd.f32 %v562, %v731
  %v758 = vadd.f32 %v563, %v734
  %v759 = vadd.f32 %v564, %v739
  %v760 = vadd.f32 %v565, %v742
  %s761 = scalar_lea.vmem %s0, 864
  %v762 = vld [vmem:[%s761] sm:$0xff]
  %v763 = vld [vmem:[%s761 + $0x10] sm:$0xff]
  %v764 = vld [vmem:[%s761 + $0x20] sm:$0xff]
  %v765 = vld [vmem:[%s761 + $0x30] sm:$0xff]
  %v766 = vld [vmem:[%s761 + $0x40] sm:$0xff]
  %v767 = vld [vmem:[%s761 + $0x50] sm:$0xff]
  %v768 = vld [vmem:[%s761 + $0x60] sm:$0xff]
  %v769 = vld [vmem:[%s761 + $0x70] sm:$0xff]
  %v770 = vld [vmem:[%s761 + $0x90] sm:$0xff]
  %v771 = vld [vmem:[%s761 + $0xa0] sm:$0xff]
  %v772 = vld [vmem:[%s761 + $0xb0] sm:$0xff]
  %v773 = vld [vmem:[%s761 + $0xc0] sm:$0xff]
  %v774 = vld [vmem:[%s761 + $0xd0] sm:$0xff]
  %v775 = vld [vmem:[%s761 + $0xe0] sm:$0xff]
  %v776 = vld [vmem:[%s761 + $0xf0] sm:$0xff]
  %v777 = vld [vmem:[%s761 + $0x100] sm:$0xff]
  %v778 = vpack.c.bf16 %v763, %v762
  %v779 = vpack.c.bf16 %v765, %v764
  %v780 = vpack.c.bf16 %v767, %v766
  %v781 = vpack.c.bf16 %v769, %v768
  %v782 = vpack.c.bf16 %v771, %v770
  %v783 = vpack.c.bf16 %v773, %v772
  %v784 = vpack.c.bf16 %v775, %v774
  %v785 = vpack.c.bf16 %v777, %v776
  %s786 = scalar_lea.vmem %s1, 128
  %v787 = vld [vmem:[%s786] sm:$0xf]
  %v788 = vld [vmem:[%s786 + $0x4] sm:$0xf]
  %v789 = vld [vmem:[%s786 + $0x8] sm:$0xf]
  %v790 = vld [vmem:[%s786 + $0xc] sm:$0xf]
  %v791 = vld [vmem:[%s786 + $0x10] sm:$0xf]
  %v792 = vld [vmem:[%s786 + $0x14] sm:$0xf]
  %v793 = vld [vmem:[%s786 + $0x18] sm:$0xf]
  %v794 = vld [vmem:[%s786 + $0x1c] sm:$0xf]
  %v803 = vunpack.c.l.b16 %v787
  %v804 = vunpack.c.l.b16 %v788
  %v805 = vunpack.c.l.b16 %v789
  %v806 = vunpack.c.l.b16 %v790
  %v807 = vunpack.c.l.b16 %v791
  %v808 = vunpack.c.l.b16 %v792
  %v809 = vunpack.c.l.b16 %v793
  %v810 = vunpack.c.l.b16 %v794
  %v811 = vpack.c.b16 %v804, %v803
  %v812 = vpack.c.b16 %v806, %v805
  %v813 = vpack.c.b16 %v808, %v807
  %v814 = vpack.c.b16 %v810, %v809
  %v820 = vsel %vm105, %v778, 0
  %v823 = vsel %vm105, %v779, 0
  %v826 = vsel %vm105, %v780, 0
  %v829 = vsel %vm105, %v781, 0
  %v832 = vsel %vm105, %v782, 0
  %v835 = vsel %vm105, %v783, 0
  %v838 = vsel %vm105, %v784, 0
  %v841 = vsel %vm105, %v785, 0
  %843 = vmatprep.subr.bf16.mxu0 0
  %844 = vmatpush1.bf16.msra.mxu0 %v811
  %845 = vmatprep.subr.bf16.mxu0 0
  %846 = vmatpush1.bf16.msra.mxu0 %v812
  %847 = vmatprep.subr.bf16.mxu0 0
  %848 = vmatpush1.bf16.msra.mxu0 %v813
  %849 = vmatprep.subr.bf16.mxu0 0
  %850 = vmatpush1.bf16.msra.mxu0 %v814
  %851 = vmatprep.subr.bf16.mxu0 0
  %852 = vmatpush1.bf16.msra.mxu0 0
  %853 = vmatprep.subr.bf16.mxu0 0
  %854 = vmatpush1.bf16.msra.mxu0 0
  %855 = vmatprep.subr.bf16.mxu0 0
  %856 = vmatpush1.bf16.msra.mxu0 0
  %857 = vmatprep.subr.bf16.mxu0 0
  %858 = vmatpush1.bf16.msra.mxu0 0
  %859 = vmatprep.subr.bf16.mxu0 0
  %860 = vmatpush1.bf16.msra.mxu0 0
  %861 = vmatprep.subr.bf16.mxu0 0
  %862 = vmatpush1.bf16.msra.mxu0 0
  %863 = vmatprep.subr.bf16.mxu0 0
  %864 = vmatpush1.bf16.msra.mxu0 0
  %865 = vmatprep.subr.bf16.mxu0 0
  %866 = vmatpush1.bf16.msra.mxu0 0
  %867 = vmatprep.subr.bf16.mxu0 0
  %868 = vmatpush1.bf16.msra.mxu0 0
  %869 = vmatprep.subr.bf16.mxu0 0
  %870 = vmatpush1.bf16.msra.mxu0 0
  %871 = vmatprep.subr.bf16.mxu0 0
  %872 = vmatpush1.bf16.msra.mxu0 0
  %873 = vmatprep.subr.bf16.mxu0 0
  %874 = vmatpush1.bf16.msra.mxu0 0
  %875 = vmatprep.mubr.bf16.mxu0 0
  %876 = vmatmul.mubr.bf16.gmra.mrb[0].mxu0 %v820
  %v877 = vpop.f32.mrb[0].mxu0
  %v878 = vadd.f32 0.0, %v877
  %v879 = vpop.f32.mrb[0].mxu0
  %v880 = vpop.f32.mrb[0].mxu0
  %v881 = vadd.f32 0.0, %v880
  %v882 = vpop.f32.mrb[0].mxu0
  %883 = vmatprep.mubr.bf16.mxu0 0
  %884 = vmatmul.mubr.bf16.gmra.mrb[0].mxu0 %v823
  %v885 = vpop.f32.mrb[0].mxu0
  %v886 = vadd.f32 0.0, %v885
  %v887 = vpop.f32.mrb[0].mxu0
  %v888 = vpop.f32.mrb[0].mxu0
  %v889 = vadd.f32 0.0, %v888
  %v890 = vpop.f32.mrb[0].mxu0
  %891 = vmatprep.mubr.bf16.mxu0 0
  %892 = vmatmul.mubr.bf16.gmra.mrb[0].mxu0 %v826
  %v893 = vpop.f32.mrb[0].mxu0
  %v894 = vadd.f32 0.0, %v893
  %v895 = vpop.f32.mrb[0].mxu0
  %v896 = vpop.f32.mrb[0].mxu0
  %v897 = vadd.f32 0.0, %v896
  %v898 = vpop.f32.mrb[0].mxu0
  %899 = vmatprep.mubr.bf16.mxu0 0
  %900 = vmatmul.mubr.bf16.gmra.mrb[0].mxu0 %v829
  %v901 = vpop.f32.mrb[0].mxu0
  %v902 = vadd.f32 0.0, %v901
  %v903 = vpop.f32.mrb[0].mxu0
  %v904 = vpop.f32.mrb[0].mxu0
  %v905 = vadd.f32 0.0, %v904
  %v906 = vpop.f32.mrb[0].mxu0
  %907 = vmatprep.mubr.bf16.mxu0 0
  %908 = vmatmul.mubr.bf16.gmra.mrb[0].mxu0 %v832
  %v909 = vpop.f32.mrb[0].mxu0
  %v910 = vadd.f32 0.0, %v909
  %v911 = vpop.f32.mrb[0].mxu0
  %v912 = vpop.f32.mrb[0].mxu0
  %v913 = vadd.f32 0.0, %v912
  %v914 = vpop.f32.mrb[0].mxu0
  %915 = vmatprep.mubr.bf16.mxu0 0
  %916 = vmatmul.mubr.bf16.gmra.mrb[0].mxu0 %v835
  %v917 = vpop.f32.mrb[0].mxu0
  %v918 = vadd.f32 0.0, %v917
  %v919 = vpop.f32.mrb[0].mxu0
  %v920 = vpop.f32.mrb[0].mxu0
  %v921 = vadd.f32 0.0, %v920
  %v922 = vpop.f32.mrb[0].mxu0
  %923 = vmatprep.mubr.bf16.mxu0 0
  %924 = vmatmul.mubr.bf16.gmra.mrb[0].mxu0 %v838
  %v925 = vpop.f32.mrb[0].mxu0
  %v926 = vadd.f32 0.0, %v925
  %v927 = vpop.f32.mrb[0].mxu0
  %v928 = vpop.f32.mrb[0].mxu0
  %v929 = vadd.f32 0.0, %v928
  %v930 = vpop.f32.mrb[0].mxu0
  %931 = vmatprep.mubr.bf16.mxu0 0
  %932 = vmatmul.mubr.bf16.gmra.mrb[0].mxu0 %v841
  %v933 = vpop.f32.mrb[0].mxu0
  %v934 = vadd.f32 0.0, %v933
  %v935 = vpop.f32.mrb[0].mxu0
  %v936 = vpop.f32.mrb[0].mxu0
  %v937 = vadd.f32 0.0, %v936
  %v938 = vpop.f32.mrb[0].mxu0
  %939 = vdwg.mxu0
  %v940 = vadd.f32 %v745, %v878
  %v941 = vadd.f32 %v746, %v881
  %v942 = vadd.f32 %v747, %v886
  %v943 = vadd.f32 %v748, %v889
  %v944 = vadd.f32 %v749, %v894
  %v945 = vadd.f32 %v750, %v897
  %v946 = vadd.f32 %v751, %v902
  %v947 = vadd.f32 %v752, %v905
  %v948 = vadd.f32 %v753, %v910
  %v949 = vadd.f32 %v754, %v913
  %v950 = vadd.f32 %v755, %v918
  %v951 = vadd.f32 %v756, %v921
  %v952 = vadd.f32 %v757, %v926
  %v953 = vadd.f32 %v758, %v929
  %v954 = vadd.f32 %v759, %v934
  %v955 = vadd.f32 %v760, %v937
  %v956 = vld [vmem:[%s566 + $0x1] sm:$0xff]
  %v957 = vld [vmem:[%s566 + $0x11] sm:$0xff]
  %v958 = vld [vmem:[%s566 + $0x21] sm:$0xff]
  %v959 = vld [vmem:[%s566 + $0x31] sm:$0xff]
  %v960 = vld [vmem:[%s566 + $0x41] sm:$0xff]
  %v961 = vld [vmem:[%s566 + $0x51] sm:$0xff]
  %v962 = vld [vmem:[%s566 + $0x61] sm:$0xff]
  %v963 = vld [vmem:[%s566 + $0x71] sm:$0xff]
  %v964 = vld [vmem:[%s566 + $0x91] sm:$0xff]
  %v965 = vld [vmem:[%s566 + $0xa1] sm:$0xff]
  %v966 = vld [vmem:[%s566 + $0xb1] sm:$0xff]
  %v967 = vld [vmem:[%s566 + $0xc1] sm:$0xff]
  %v968 = vld [vmem:[%s566 + $0xd1] sm:$0xff]
  %v969 = vld [vmem:[%s566 + $0xe1] sm:$0xff]
  %v970 = vld [vmem:[%s566 + $0xf1] sm:$0xff]
  %v971 = vld [vmem:[%s566 + $0x101] sm:$0xff]
  %v972 = vpack.c.bf16 %v957, %v956
  %v973 = vpack.c.bf16 %v959, %v958
  %v974 = vpack.c.bf16 %v961, %v960
  %v975 = vpack.c.bf16 %v963, %v962
  %v976 = vpack.c.bf16 %v965, %v964
  %v977 = vpack.c.bf16 %v967, %v966
  %v978 = vpack.c.bf16 %v969, %v968
  %v979 = vpack.c.bf16 %v971, %v970
  %s980 = scalar_lea.vmem %s1, 160
  %v981 = vld [vmem:[%s980] sm:$0xf]
  %v982 = vld [vmem:[%s980 + $0x4] sm:$0xf]
  %v983 = vld [vmem:[%s980 + $0x8] sm:$0xf]
  %v984 = vld [vmem:[%s980 + $0xc] sm:$0xf]
  %v985 = vld [vmem:[%s980 + $0x10] sm:$0xf]
  %v986 = vld [vmem:[%s980 + $0x14] sm:$0xf]
  %v987 = vld [vmem:[%s980 + $0x18] sm:$0xf]
  %v988 = vld [vmem:[%s980 + $0x1c] sm:$0xf]
  %v997 = vunpack.c.l.b16 %v981
  %v998 = vunpack.c.l.b16 %v982
  %v999 = vunpack.c.l.b16 %v983
  %v1000 = vunpack.c.l.b16 %v984
  %v1001 = vunpack.c.l.b16 %v985
  %v1002 = vunpack.c.l.b16 %v986
  %v1003 = vunpack.c.l.b16 %v987
  %v1004 = vunpack.c.l.b16 %v988
  %v1005 = vpack.c.b16 %v998, %v997
  %v1006 = vpack.c.b16 %v1000, %v999
  %v1007 = vpack.c.b16 %v1002, %v1001
  %v1008 = vpack.c.b16 %v1004, %v1003
  %v1014 = vsel %vm105, %v972, 0
  %v1017 = vsel %vm105, %v973, 0
  %v1020 = vsel %vm105, %v974, 0
  %v1023 = vsel %vm105, %v975, 0
  %v1026 = vsel %vm105, %v976, 0
  %v1029 = vsel %vm105, %v977, 0
  %v1032 = vsel %vm105, %v978, 0
  %v1035 = vsel %vm105, %v979, 0
  %1037 = vmatprep.subr.bf16.mxu0 0
  %1038 = vmatpush1.bf16.msra.mxu0 %v1005
  %1039 = vmatprep.subr.bf16.mxu0 0
  %1040 = vmatpush1.bf16.msra.mxu0 %v1006
  %1041 = vmatprep.subr.bf16.mxu0 0
  %1042 = vmatpush1.bf16.msra.mxu0 %v1007
  %1043 = vmatprep.subr.bf16.mxu0 0
  %1044 = vmatpush1.bf16.msra.mxu0 %v1008
  %1045 = vmatprep.subr.bf16.mxu0 0
  %1046 = vmatpush1.bf16.msra.mxu0 0
  %1047 = vmatprep.subr.bf16.mxu0 0
  %1048 = vmatpush1.bf16.msra.mxu0 0
  %1049 = vmatprep.subr.bf16.mxu0 0
  %1050 = vmatpush1.bf16.msra.mxu0 0
  %1051 = vmatprep.subr.bf16.mxu0 0
  %1052 = vmatpush1.bf16.msra.mxu0 0
  %1053 = vmatprep.subr.bf16.mxu0 0
  %1054 = vmatpush1.bf16.msra.mxu0 0
  %1055 = vmatprep.subr.bf16.mxu0 0
  %1056 = vmatpush1.bf16.msra.mxu0 0
  %1057 = vmatprep.subr.bf16.mxu0 0
  %1058 = vmatpush1.bf16.msra.mxu0 0
  %1059 = vmatprep.subr.bf16.mxu0 0
  %1060 = vmatpush1.bf16.msra.mxu0 0
  %1061 = vmatprep.subr.bf16.mxu0 0
  %1062 = vmatpush1.bf16.msra.mxu0 0
  %1063 = vmatprep.subr.bf16.mxu0 0
  %1064 = vmatpush1.bf16.msra.mxu0 0
  %1065 = vmatprep.subr.bf16.mxu0 0
  %1066 = vmatpush1.bf16.msra.mxu0 0
  %1067 = vmatprep.subr.bf16.mxu0 0
  %1068 = vmatpush1.bf16.msra.mxu0 0
  %1069 = vmatprep.mubr.bf16.mxu0 0
  %1070 = vmatmul.mubr.bf16.gmra.mrb[0].mxu0 %v1014
  %v1071 = vpop.f32.mrb[0].mxu0
  %v1072 = vadd.f32 0.0, %v1071
  %v1073 = vpop.f32.mrb[0].mxu0
  %v1074 = vpop.f32.mrb[0].mxu0
  %v1075 = vadd.f32 0.0, %v1074
  %v1076 = vpop.f32.mrb[0].mxu0
  %1077 = vmatprep.mubr.bf16.mxu0 0
  %1078 = vmatmul.mubr.bf16.gmra.mrb[0].mxu0 %v1017
  %v1079 = vpop.f32.mrb[0].mxu0
  %v1080 = vadd.f32 0.0, %v1079
  %v1081 = vpop.f32.mrb[0].mxu0
  %v1082 = vpop.f32.mrb[0].mxu0
  %v1083 = vadd.f32 0.0, %v1082
  %v1084 = vpop.f32.mrb[0].mxu0
  %1085 = vmatprep.mubr.bf16.mxu0 0
  %1086 = vmatmul.mubr.bf16.gmra.mrb[0].mxu0 %v1020
  %v1087 = vpop.f32.mrb[0].mxu0
  %v1088 = vadd.f32 0.0, %v1087
  %v1089 = vpop.f32.mrb[0].mxu0
  %v1090 = vpop.f32.mrb[0].mxu0
  %v1091 = vadd.f32 0.0, %v1090
  %v1092 = vpop.f32.mrb[0].mxu0
  %1093 = vmatprep.mubr.bf16.mxu0 0
  %1094 = vmatmul.mubr.bf16.gmra.mrb[0].mxu0 %v1023
  %v1095 = vpop.f32.mrb[0].mxu0
  %v1096 = vadd.f32 0.0, %v1095
  %v1097 = vpop.f32.mrb[0].mxu0
  %v1098 = vpop.f32.mrb[0].mxu0
  %v1099 = vadd.f32 0.0, %v1098
  %v1100 = vpop.f32.mrb[0].mxu0
  %1101 = vmatprep.mubr.bf16.mxu0 0
  %1102 = vmatmul.mubr.bf16.gmra.mrb[0].mxu0 %v1026
  %v1103 = vpop.f32.mrb[0].mxu0
  %v1104 = vadd.f32 0.0, %v1103
  %v1105 = vpop.f32.mrb[0].mxu0
  %v1106 = vpop.f32.mrb[0].mxu0
  %v1107 = vadd.f32 0.0, %v1106
  %v1108 = vpop.f32.mrb[0].mxu0
  %1109 = vmatprep.mubr.bf16.mxu0 0
  %1110 = vmatmul.mubr.bf16.gmra.mrb[0].mxu0 %v1029
  %v1111 = vpop.f32.mrb[0].mxu0
  %v1112 = vadd.f32 0.0, %v1111
  %v1113 = vpop.f32.mrb[0].mxu0
  %v1114 = vpop.f32.mrb[0].mxu0
  %v1115 = vadd.f32 0.0, %v1114
  %v1116 = vpop.f32.mrb[0].mxu0
  %1117 = vmatprep.mubr.bf16.mxu0 0
  %1118 = vmatmul.mubr.bf16.gmra.mrb[0].mxu0 %v1032
  %v1119 = vpop.f32.mrb[0].mxu0
  %v1120 = vadd.f32 0.0, %v1119
  %v1121 = vpop.f32.mrb[0].mxu0
  %v1122 = vpop.f32.mrb[0].mxu0
  %v1123 = vadd.f32 0.0, %v1122
  %v1124 = vpop.f32.mrb[0].mxu0
  %1125 = vmatprep.mubr.bf16.mxu0 0
  %1126 = vmatmul.mubr.bf16.gmra.mrb[0].mxu0 %v1035
  %v1127 = vpop.f32.mrb[0].mxu0
  %v1128 = vadd.f32 0.0, %v1127
  %v1129 = vpop.f32.mrb[0].mxu0
  %v1130 = vpop.f32.mrb[0].mxu0
  %v1131 = vadd.f32 0.0, %v1130
  %v1132 = vpop.f32.mrb[0].mxu0
  %1133 = vdwg.mxu0
  %v1134 = vadd.f32 %v940, %v1072
  %v1135 = vadd.f32 %v941, %v1075
  %v1136 = vadd.f32 %v942, %v1080
  %v1137 = vadd.f32 %v943, %v1083
  %v1138 = vadd.f32 %v944, %v1088
  %v1139 = vadd.f32 %v945, %v1091
  %v1140 = vadd.f32 %v946, %v1096
  %v1141 = vadd.f32 %v947, %v1099
  %v1142 = vadd.f32 %v948, %v1104
  %v1143 = vadd.f32 %v949, %v1107
  %v1144 = vadd.f32 %v950, %v1112
  %v1145 = vadd.f32 %v951, %v1115
  %v1146 = vadd.f32 %v952, %v1120
  %v1147 = vadd.f32 %v953, %v1123
  %v1148 = vadd.f32 %v954, %v1128
  %v1149 = vadd.f32 %v955, %v1131
  %s1150 = scalar_lea.vmem %s0, 16
  %v1151 = vld [vmem:[%s1150] sm:$0xff]
  %v1152 = vld [vmem:[%s1150 + $0x10] sm:$0xff]
  %v1153 = vld [vmem:[%s1150 + $0x20] sm:$0xff]
  %v1154 = vld [vmem:[%s1150 + $0x30] sm:$0xff]
  %v1155 = vld [vmem:[%s1150 + $0x40] sm:$0xff]
  %v1156 = vld [vmem:[%s1150 + $0x50] sm:$0xff]
  %v1157 = vld [vmem:[%s1150 + $0x60] sm:$0xff]
  %v1158 = vld [vmem:[%s1150 + $0x70] sm:$0xff]
  %v1159 = vld [vmem:[%s1150 + $0x90] sm:$0xff]
  %v1160 = vld [vmem:[%s1150 + $0xa0] sm:$0xff]
  %v1161 = vld [vmem:[%s1150 + $0xb0] sm:$0xff]
  %v1162 = vld [vmem:[%s1150 + $0xc0] sm:$0xff]
  %v1163 = vld [vmem:[%s1150 + $0xd0] sm:$0xff]
  %v1164 = vld [vmem:[%s1150 + $0xe0] sm:$0xff]
  %v1165 = vld [vmem:[%s1150 + $0xf0] sm:$0xff]
  %v1166 = vld [vmem:[%s1150 + $0x100] sm:$0xff]
  %v1167 = vpack.c.bf16 %v1152, %v1151
  %v1168 = vpack.c.bf16 %v1154, %v1153
  %v1169 = vpack.c.bf16 %v1156, %v1155
  %v1170 = vpack.c.bf16 %v1158, %v1157
  %v1171 = vpack.c.bf16 %v1160, %v1159
  %v1172 = vpack.c.bf16 %v1162, %v1161
  %v1173 = vpack.c.bf16 %v1164, %v1163
  %v1174 = vpack.c.bf16 %v1166, %v1165
  %s1175 = scalar_lea.vmem %s1, 192
  %v1176 = vld [vmem:[%s1175] sm:$0xf]
  %v1177 = vld [vmem:[%s1175 + $0x4] sm:$0xf]
  %v1178 = vld [vmem:[%s1175 + $0x8] sm:$0xf]
  %v1179 = vld [vmem:[%s1175 + $0xc] sm:$0xf]
  %v1180 = vld [vmem:[%s1175 + $0x10] sm:$0xf]
  %v1181 = vld [vmem:[%s1175 + $0x14] sm:$0xf]
  %v1182 = vld [vmem:[%s1175 + $0x18] sm:$0xf]
  %v1183 = vld [vmem:[%s1175 + $0x1c] sm:$0xf]
  %v1192 = vunpack.c.l.b16 %v1176
  %v1193 = vunpack.c.l.b16 %v1177
  %v1194 = vunpack.c.l.b16 %v1178
  %v1195 = vunpack.c.l.b16 %v1179
  %v1196 = vunpack.c.l.b16 %v1180
  %v1197 = vunpack.c.l.b16 %v1181
  %v1198 = vunpack.c.l.b16 %v1182
  %v1199 = vunpack.c.l.b16 %v1183
  %v1200 = vpack.c.b16 %v1193, %v1192
  %v1201 = vpack.c.b16 %v1195, %v1194
  %v1202 = vpack.c.b16 %v1197, %v1196
  %v1203 = vpack.c.b16 %v1199, %v1198
  %v1209 = vsel %vm105, %v1167, 0
  %v1212 = vsel %vm105, %v1168, 0
  %v1215 = vsel %vm105, %v1169, 0
  %v1218 = vsel %vm105, %v1170, 0
  %v1221 = vsel %vm105, %v1171, 0
  %v1224 = vsel %vm105, %v1172, 0
  %v1227 = vsel %vm105, %v1173, 0
  %v1230 = vsel %vm105, %v1174, 0
  %1232 = vmatprep.subr.bf16.mxu0 0
  %1233 = vmatpush1.bf16.msra.mxu0 %v1200
  %1234 = vmatprep.subr.bf16.mxu0 0
  %1235 = vmatpush1.bf16.msra.mxu0 %v1201
  %1236 = vmatprep.subr.bf16.mxu0 0
  %1237 = vmatpush1.bf16.msra.mxu0 %v1202
  %1238 = vmatprep.subr.bf16.mxu0 0
  %1239 = vmatpush1.bf16.msra.mxu0 %v1203
  %1240 = vmatprep.subr.bf16.mxu0 0
  %1241 = vmatpush1.bf16.msra.mxu0 0
  %1242 = vmatprep.subr.bf16.mxu0 0
  %1243 = vmatpush1.bf16.msra.mxu0 0
  %1244 = vmatprep.subr.bf16.mxu0 0
  %1245 = vmatpush1.bf16.msra.mxu0 0
  %1246 = vmatprep.subr.bf16.mxu0 0
  %1247 = vmatpush1.bf16.msra.mxu0 0
  %1248 = vmatprep.subr.bf16.mxu0 0
  %1249 = vmatpush1.bf16.msra.mxu0 0
  %1250 = vmatprep.subr.bf16.mxu0 0
  %1251 = vmatpush1.bf16.msra.mxu0 0
  %1252 = vmatprep.subr.bf16.mxu0 0
  %1253 = vmatpush1.bf16.msra.mxu0 0
  %1254 = vmatprep.subr.bf16.mxu0 0
  %1255 = vmatpush1.bf16.msra.mxu0 0
  %1256 = vmatprep.subr.bf16.mxu0 0
  %1257 = vmatpush1.bf16.msra.mxu0 0
  %1258 = vmatprep.subr.bf16.mxu0 0
  %1259 = vmatpush1.bf16.msra.mxu0 0
  %1260 = vmatprep.subr.bf16.mxu0 0
  %1261 = vmatpush1.bf16.msra.mxu0 0
  %1262 = vmatprep.subr.bf16.mxu0 0
  %1263 = vmatpush1.bf16.msra.mxu0 0
  %1264 = vmatprep.mubr.bf16.mxu0 0
  %1265 = vmatmul.mubr.bf16.gmra.mrb[0].mxu0 %v1209
  %v1266 = vpop.f32.mrb[0].mxu0
  %v1267 = vadd.f32 0.0, %v1266
  %v1268 = vpop.f32.mrb[0].mxu0
  %v1269 = vpop.f32.mrb[0].mxu0
  %v1270 = vadd.f32 0.0, %v1269
  %v1271 = vpop.f32.mrb[0].mxu0
  %1272 = vmatprep.mubr.bf16.mxu0 0
  %1273 = vmatmul.mubr.bf16.gmra.mrb[0].mxu0 %v1212
  %v1274 = vpop.f32.mrb[0].mxu0
  %v1275 = vadd.f32 0.0, %v1274
  %v1276 = vpop.f32.mrb[0].mxu0
  %v1277 = vpop.f32.mrb[0].mxu0
  %v1278 = vadd.f32 0.0, %v1277
  %v1279 = vpop.f32.mrb[0].mxu0
  %1280 = vmatprep.mubr.bf16.mxu0 0
  %1281 = vmatmul.mubr.bf16.gmra.mrb[0].mxu0 %v1215
  %v1282 = vpop.f32.mrb[0].mxu0
  %v1283 = vadd.f32 0.0, %v1282
  %v1284 = vpop.f32.mrb[0].mxu0
  %v1285 = vpop.f32.mrb[0].mxu0
  %v1286 = vadd.f32 0.0, %v1285
  %v1287 = vpop.f32.mrb[0].mxu0
  %1288 = vmatprep.mubr.bf16.mxu0 0
  %1289 = vmatmul.mubr.bf16.gmra.mrb[0].mxu0 %v1218
  %v1290 = vpop.f32.mrb[0].mxu0
  %v1291 = vadd.f32 0.0, %v1290
  %v1292 = vpop.f32.mrb[0].mxu0
  %v1293 = vpop.f32.mrb[0].mxu0
  %v1294 = vadd.f32 0.0, %v1293
  %v1295 = vpop.f32.mrb[0].mxu0
  %1296 = vmatprep.mubr.bf16.mxu0 0
  %1297 = vmatmul.mubr.bf16.gmra.mrb[0].mxu0 %v1221
  %v1298 = vpop.f32.mrb[0].mxu0
  %v1299 = vadd.f32 0.0, %v1298
  %v1300 = vpop.f32.mrb[0].mxu0
  %v1301 = vpop.f32.mrb[0].mxu0
  %v1302 = vadd.f32 0.0, %v1301
  %v1303 = vpop.f32.mrb[0].mxu0
  %1304 = vmatprep.mubr.bf16.mxu0 0
  %1305 = vmatmul.mubr.bf16.gmra.mrb[0].mxu0 %v1224
  %v1306 = vpop.f32.mrb[0].mxu0
  %v1307 = vadd.f32 0.0, %v1306
  %v1308 = vpop.f32.mrb[0].mxu0
  %v1309 = vpop.f32.mrb[0].mxu0
  %v1310 = vadd.f32 0.0, %v1309
  %v1311 = vpop.f32.mrb[0].mxu0
  %1312 = vmatprep.mubr.bf16.mxu0 0
  %1313 = vmatmul.mubr.bf16.gmra.mrb[0].mxu0 %v1227
  %v1314 = vpop.f32.mrb[0].mxu0
  %v1315 = vadd.f32 0.0, %v1314
  %v1316 = vpop.f32.mrb[0].mxu0
  %v1317 = vpop.f32.mrb[0].mxu0
  %v1318 = vadd.f32 0.0, %v1317
  %v1319 = vpop.f32.mrb[0].mxu0
  %1320 = vmatprep.mubr.bf16.mxu0 0
  %1321 = vmatmul.mubr.bf16.gmra.mrb[0].mxu0 %v1230
  %v1322 = vpop.f32.mrb[0].mxu0
  %v1323 = vadd.f32 0.0, %v1322
  %v1324 = vpop.f32.mrb[0].mxu0
  %v1325 = vpop.f32.mrb[0].mxu0
  %v1326 = vadd.f32 0.0, %v1325
  %v1327 = vpop.f32.mrb[0].mxu0
  %1328 = vdwg.mxu0
  %v1329 = vadd.f32 %v1134, %v1267
  %v1330 = vadd.f32 %v1135, %v1270
  %v1331 = vadd.f32 %v1136, %v1275
  %v1332 = vadd.f32 %v1137, %v1278
  %v1333 = vadd.f32 %v1138, %v1283
  %v1334 = vadd.f32 %v1139, %v1286
  %v1335 = vadd.f32 %v1140, %v1291
  %v1336 = vadd.f32 %v1141, %v1294
  %v1337 = vadd.f32 %v1142, %v1299
  %v1338 = vadd.f32 %v1143, %v1302
  %v1339 = vadd.f32 %v1144, %v1307
  %v1340 = vadd.f32 %v1145, %v1310
  %v1341 = vadd.f32 %v1146, %v1315
  %v1342 = vadd.f32 %v1147, %v1318
  %v1343 = vadd.f32 %v1148, %v1323
  %v1344 = vadd.f32 %v1149, %v1326
  %s1345 = scalar_lea.vmem %s0, 304
  %v1346 = vld [vmem:[%s1345] sm:$0xff]
  %v1347 = vld [vmem:[%s1345 + $0x10] sm:$0xff]
  %v1348 = vld [vmem:[%s1345 + $0x20] sm:$0xff]
  %v1349 = vld [vmem:[%s1345 + $0x30] sm:$0xff]
  %v1350 = vld [vmem:[%s1345 + $0x40] sm:$0xff]
  %v1351 = vld [vmem:[%s1345 + $0x50] sm:$0xff]
  %v1352 = vld [vmem:[%s1345 + $0x60] sm:$0xff]
  %v1353 = vld [vmem:[%s1345 + $0x70] sm:$0xff]
  %v1354 = vld [vmem:[%s1345 + $0x90] sm:$0xff]
  %v1355 = vld [vmem:[%s1345 + $0xa0] sm:$0xff]
  %v1356 = vld [vmem:[%s1345 + $0xb0] sm:$0xff]
  %v1357 = vld [vmem:[%s1345 + $0xc0] sm:$0xff]
  %v1358 = vld [vmem:[%s1345 + $0xd0] sm:$0xff]
  %v1359 = vld [vmem:[%s1345 + $0xe0] sm:$0xff]
  %v1360 = vld [vmem:[%s1345 + $0xf0] sm:$0xff]
  %v1361 = vld [vmem:[%s1345 + $0x100] sm:$0xff]
  %v1362 = vpack.c.bf16 %v1347, %v1346
  %v1363 = vpack.c.bf16 %v1349, %v1348
  %v1364 = vpack.c.bf16 %v1351, %v1350
  %v1365 = vpack.c.bf16 %v1353, %v1352
  %v1366 = vpack.c.bf16 %v1355, %v1354
  %v1367 = vpack.c.bf16 %v1357, %v1356
  %v1368 = vpack.c.bf16 %v1359, %v1358
  %v1369 = vpack.c.bf16 %v1361, %v1360
  %s1370 = scalar_lea.vmem %s1, 224
  %v1371 = vld [vmem:[%s1370] sm:$0xf]
  %v1372 = vld [vmem:[%s1370 + $0x4] sm:$0xf]
  %v1373 = vld [vmem:[%s1370 + $0x8] sm:$0xf]
  %v1374 = vld [vmem:[%s1370 + $0xc] sm:$0xf]
  %v1375 = vld [vmem:[%s1370 + $0x10] sm:$0xf]
  %v1376 = vld [vmem:[%s1370 + $0x14] sm:$0xf]
  %v1377 = vld [vmem:[%s1370 + $0x18] sm:$0xf]
  %v1378 = vld [vmem:[%s1370 + $0x1c] sm:$0xf]
  %v1387 = vunpack.c.l.b16 %v1371
  %v1388 = vunpack.c.l.b16 %v1372
  %v1389 = vunpack.c.l.b16 %v1373
  %v1390 = vunpack.c.l.b16 %v1374
  %v1391 = vunpack.c.l.b16 %v1375
  %v1392 = vunpack.c.l.b16 %v1376
  %v1393 = vunpack.c.l.b16 %v1377
  %v1394 = vunpack.c.l.b16 %v1378
  %v1395 = vpack.c.b16 %v1388, %v1387
  %v1396 = vpack.c.b16 %v1390, %v1389
  %v1397 = vpack.c.b16 %v1392, %v1391
  %v1398 = vpack.c.b16 %v1394, %v1393
  %v1404 = vsel %vm105, %v1362, 0
  %v1407 = vsel %vm105, %v1363, 0
  %v1410 = vsel %vm105, %v1364, 0
  %v1413 = vsel %vm105, %v1365, 0
  %v1416 = vsel %vm105, %v1366, 0
  %v1419 = vsel %vm105, %v1367, 0
  %v1422 = vsel %vm105, %v1368, 0
  %v1425 = vsel %vm105, %v1369, 0
  %1427 = vmatprep.subr.bf16.mxu0 0
  %1428 = vmatpush1.bf16.msra.mxu0 %v1395
  %1429 = vmatprep.subr.bf16.mxu0 0
  %1430 = vmatpush1.bf16.msra.mxu0 %v1396
  %1431 = vmatprep.subr.bf16.mxu0 0
  %1432 = vmatpush1.bf16.msra.mxu0 %v1397
  %1433 = vmatprep.subr.bf16.mxu0 0
  %1434 = vmatpush1.bf16.msra.mxu0 %v1398
  %1435 = vmatprep.subr.bf16.mxu0 0
  %1436 = vmatpush1.bf16.msra.mxu0 0
  %1437 = vmatprep.subr.bf16.mxu0 0
  %1438 = vmatpush1.bf16.msra.mxu0 0
  %1439 = vmatprep.subr.bf16.mxu0 0
  %1440 = vmatpush1.bf16.msra.mxu0 0
  %1441 = vmatprep.subr.bf16.mxu0 0
  %1442 = vmatpush1.bf16.msra.mxu0 0
  %1443 = vmatprep.subr.bf16.mxu0 0
  %1444 = vmatpush1.bf16.msra.mxu0 0
  %1445 = vmatprep.subr.bf16.mxu0 0
  %1446 = vmatpush1.bf16.msra.mxu0 0
  %1447 = vmatprep.subr.bf16.mxu0 0
  %1448 = vmatpush1.bf16.msra.mxu0 0
  %1449 = vmatprep.subr.bf16.mxu0 0
  %1450 = vmatpush1.bf16.msra.mxu0 0
  %1451 = vmatprep.subr.bf16.mxu0 0
  %1452 = vmatpush1.bf16.msra.mxu0 0
  %1453 = vmatprep.subr.bf16.mxu0 0
  %1454 = vmatpush1.bf16.msra.mxu0 0
  %1455 = vmatprep.subr.bf16.mxu0 0
  %1456 = vmatpush1.bf16.msra.mxu0 0
  %1457 = vmatprep.subr.bf16.mxu0 0
  %1458 = vmatpush1.bf16.msra.mxu0 0
  %1459 = vmatprep.mubr.bf16.mxu0 0
  %1460 = vmatmul.mubr.bf16.gmra.mrb[0].mxu0 %v1404
  %v1461 = vpop.f32.mrb[0].mxu0
  %v1462 = vadd.f32 0.0, %v1461
  %v1463 = vpop.f32.mrb[0].mxu0
  %v1464 = vpop.f32.mrb[0].mxu0
  %v1465 = vadd.f32 0.0, %v1464
  %v1466 = vpop.f32.mrb[0].mxu0
  %1467 = vmatprep.mubr.bf16.mxu0 0
  %1468 = vmatmul.mubr.bf16.gmra.mrb[0].mxu0 %v1407
  %v1469 = vpop.f32.mrb[0].mxu0
  %v1470 = vadd.f32 0.0, %v1469
  %v1471 = vpop.f32.mrb[0].mxu0
  %v1472 = vpop.f32.mrb[0].mxu0
  %v1473 = vadd.f32 0.0, %v1472
  %v1474 = vpop.f32.mrb[0].mxu0
  %1475 = vmatprep.mubr.bf16.mxu0 0
  %1476 = vmatmul.mubr.bf16.gmra.mrb[0].mxu0 %v1410
  %v1477 = vpop.f32.mrb[0].mxu0
  %v1478 = vadd.f32 0.0, %v1477
  %v1479 = vpop.f32.mrb[0].mxu0
  %v1480 = vpop.f32.mrb[0].mxu0
  %v1481 = vadd.f32 0.0, %v1480
  %v1482 = vpop.f32.mrb[0].mxu0
  %1483 = vmatprep.mubr.bf16.mxu0 0
  %1484 = vmatmul.mubr.bf16.gmra.mrb[0].mxu0 %v1413
  %v1485 = vpop.f32.mrb[0].mxu0
  %v1486 = vadd.f32 0.0, %v1485
  %v1487 = vpop.f32.mrb[0].mxu0
  %v1488 = vpop.f32.mrb[0].mxu0
  %v1489 = vadd.f32 0.0, %v1488
  %v1490 = vpop.f32.mrb[0].mxu0
  %1491 = vmatprep.mubr.bf16.mxu0 0
  %1492 = vmatmul.mubr.bf16.gmra.mrb[0].mxu0 %v1416
  %v1493 = vpop.f32.mrb[0].mxu0
  %v1494 = vadd.f32 0.0, %v1493
  %v1495 = vpop.f32.mrb[0].mxu0
  %v1496 = vpop.f32.mrb[0].mxu0
  %v1497 = vadd.f32 0.0, %v1496
  %v1498 = vpop.f32.mrb[0].mxu0
  %1499 = vmatprep.mubr.bf16.mxu0 0
  %1500 = vmatmul.mubr.bf16.gmra.mrb[0].mxu0 %v1419
  %v1501 = vpop.f32.mrb[0].mxu0
  %v1502 = vadd.f32 0.0, %v1501
  %v1503 = vpop.f32.mrb[0].mxu0
  %v1504 = vpop.f32.mrb[0].mxu0
  %v1505 = vadd.f32 0.0, %v1504
  %v1506 = vpop.f32.mrb[0].mxu0
  %1507 = vmatprep.mubr.bf16.mxu0 0
  %1508 = vmatmul.mubr.bf16.gmra.mrb[0].mxu0 %v1422
  %v1509 = vpop.f32.mrb[0].mxu0
  %v1510 = vadd.f32 0.0, %v1509
  %v1511 = vpop.f32.mrb[0].mxu0
  %v1512 = vpop.f32.mrb[0].mxu0
  %v1513 = vadd.f32 0.0, %v1512
  %v1514 = vpop.f32.mrb[0].mxu0
  %1515 = vmatprep.mubr.bf16.mxu0 0
  %1516 = vmatmul.mubr.bf16.gmra.mrb[0].mxu0 %v1425
  %v1517 = vpop.f32.mrb[0].mxu0
  %v1518 = vadd.f32 0.0, %v1517
  %v1519 = vpop.f32.mrb[0].mxu0
  %v1520 = vpop.f32.mrb[0].mxu0
  %v1521 = vadd.f32 0.0, %v1520
  %v1522 = vpop.f32.mrb[0].mxu0
  %1523 = vdwg.mxu0
  %v1524 = vadd.f32 %v1329, %v1462
  %v1525 = vadd.f32 %v1330, %v1465
  %v1526 = vadd.f32 %v1331, %v1470
  %v1527 = vadd.f32 %v1332, %v1473
  %v1528 = vadd.f32 %v1333, %v1478
  %v1529 = vadd.f32 %v1334, %v1481
  %v1530 = vadd.f32 %v1335, %v1486
  %v1531 = vadd.f32 %v1336, %v1489
  %v1532 = vadd.f32 %v1337, %v1494
  %v1533 = vadd.f32 %v1338, %v1497
  %v1534 = vadd.f32 %v1339, %v1502
  %v1535 = vadd.f32 %v1340, %v1505
  %v1536 = vadd.f32 %v1341, %v1510
  %v1537 = vadd.f32 %v1342, %v1513
  %v1538 = vadd.f32 %v1343, %v1518
  %v1539 = vadd.f32 %v1344, %v1521
  %v1540 = vld [vmem:[%s1150 + $0x1] sm:$0xff]
  %v1541 = vld [vmem:[%s1150 + $0x11] sm:$0xff]
  %v1542 = vld [vmem:[%s1150 + $0x21] sm:$0xff]
  %v1543 = vld [vmem:[%s1150 + $0x31] sm:$0xff]
  %v1544 = vld [vmem:[%s1150 + $0x41] sm:$0xff]
  %v1545 = vld [vmem:[%s1150 + $0x51] sm:$0xff]
  %v1546 = vld [vmem:[%s1150 + $0x61] sm:$0xff]
  %v1547 = vld [vmem:[%s1150 + $0x71] sm:$0xff]
  %v1548 = vld [vmem:[%s1150 + $0x91] sm:$0xff]
  %v1549 = vld [vmem:[%s1150 + $0xa1] sm:$0xff]
  %v1550 = vld [vmem:[%s1150 + $0xb1] sm:$0xff]
  %v1551 = vld [vmem:[%s1150 + $0xc1] sm:$0xff]
  %v1552 = vld [vmem:[%s1150 + $0xd1] sm:$0xff]
  %v1553 = vld [vmem:[%s1150 + $0xe1] sm:$0xff]
  %v1554 = vld [vmem:[%s1150 + $0xf1] sm:$0xff]
  %v1555 = vld [vmem:[%s1150 + $0x101] sm:$0xff]
  %v1556 = vpack.c.bf16 %v1541, %v1540
  %v1557 = vpack.c.bf16 %v1543, %v1542
  %v1558 = vpack.c.bf16 %v1545, %v1544
  %v1559 = vpack.c.bf16 %v1547, %v1546
  %v1560 = vpack.c.bf16 %v1549, %v1548
  %v1561 = vpack.c.bf16 %v1551, %v1550
  %v1562 = vpack.c.bf16 %v1553, %v1552
  %v1563 = vpack.c.bf16 %v1555, %v1554
  %s1564 = scalar_lea.vmem %s1, 256
  %v1565 = vld [vmem:[%s1564] sm:$0xf]
  %v1566 = vld [vmem:[%s1564 + $0x4] sm:$0xf]
  %v1567 = vld [vmem:[%s1564 + $0x8] sm:$0xf]
  %v1568 = vld [vmem:[%s1564 + $0xc] sm:$0xf]
  %v1569 = vld [vmem:[%s1564 + $0x10] sm:$0xf]
  %v1570 = vld [vmem:[%s1564 + $0x14] sm:$0xf]
  %v1571 = vld [vmem:[%s1564 + $0x18] sm:$0xf]
  %v1572 = vld [vmem:[%s1564 + $0x1c] sm:$0xf]
  %v1581 = vunpack.c.l.b16 %v1565
  %v1582 = vunpack.c.l.b16 %v1566
  %v1583 = vunpack.c.l.b16 %v1567
  %v1584 = vunpack.c.l.b16 %v1568
  %v1585 = vunpack.c.l.b16 %v1569
  %v1586 = vunpack.c.l.b16 %v1570
  %v1587 = vunpack.c.l.b16 %v1571
  %v1588 = vunpack.c.l.b16 %v1572
  %v1589 = vpack.c.b16 %v1582, %v1581
  %v1590 = vpack.c.b16 %v1584, %v1583
  %v1591 = vpack.c.b16 %v1586, %v1585
  %v1592 = vpack.c.b16 %v1588, %v1587
  %v1598 = vsel %vm105, %v1556, 0
  %v1601 = vsel %vm105, %v1557, 0
  %v1604 = vsel %vm105, %v1558, 0
  %v1607 = vsel %vm105, %v1559, 0
  %v1610 = vsel %vm105, %v1560, 0
  %v1613 = vsel %vm105, %v1561, 0
  %v1616 = vsel %vm105, %v1562, 0
  %v1619 = vsel %vm105, %v1563, 0
  %1621 = vmatprep.subr.bf16.mxu0 0
  %1622 = vmatpush1.bf16.msra.mxu0 %v1589
  %1623 = vmatprep.subr.bf16.mxu0 0
  %1624 = vmatpush1.bf16.msra.mxu0 %v1590
  %1625 = vmatprep.subr.bf16.mxu0 0
  %1626 = vmatpush1.bf16.msra.mxu0 %v1591
  %1627 = vmatprep.subr.bf16.mxu0 0
  %1628 = vmatpush1.bf16.msra.mxu0 %v1592
  %1629 = vmatprep.subr.bf16.mxu0 0
  %1630 = vmatpush1.bf16.msra.mxu0 0
  %1631 = vmatprep.subr.bf16.mxu0 0
  %1632 = vmatpush1.bf16.msra.mxu0 0
  %1633 = vmatprep.subr.bf16.mxu0 0
  %1634 = vmatpush1.bf16.msra.mxu0 0
  %1635 = vmatprep.subr.bf16.mxu0 0
  %1636 = vmatpush1.bf16.msra.mxu0 0
  %1637 = vmatprep.subr.bf16.mxu0 0
  %1638 = vmatpush1.bf16.msra.mxu0 0
  %1639 = vmatprep.subr.bf16.mxu0 0
  %1640 = vmatpush1.bf16.msra.mxu0 0
  %1641 = vmatprep.subr.bf16.mxu0 0
  %1642 = vmatpush1.bf16.msra.mxu0 0
  %1643 = vmatprep.subr.bf16.mxu0 0
  %1644 = vmatpush1.bf16.msra.mxu0 0
  %1645 = vmatprep.subr.bf16.mxu0 0
  %1646 = vmatpush1.bf16.msra.mxu0 0
  %1647 = vmatprep.subr.bf16.mxu0 0
  %1648 = vmatpush1.bf16.msra.mxu0 0
  %1649 = vmatprep.subr.bf16.mxu0 0
  %1650 = vmatpush1.bf16.msra.mxu0 0
  %1651 = vmatprep.subr.bf16.mxu0 0
  %1652 = vmatpush1.bf16.msra.mxu0 0
  %1653 = vmatprep.mubr.bf16.mxu0 0
  %1654 = vmatmul.mubr.bf16.gmra.mrb[0].mxu0 %v1598
  %v1655 = vpop.f32.mrb[0].mxu0
  %v1656 = vadd.f32 0.0, %v1655
  %v1657 = vpop.f32.mrb[0].mxu0
  %v1658 = vpop.f32.mrb[0].mxu0
  %v1659 = vadd.f32 0.0, %v1658
  %v1660 = vpop.f32.mrb[0].mxu0
  %1661 = vmatprep.mubr.bf16.mxu0 0
  %1662 = vmatmul.mubr.bf16.gmra.mrb[0].mxu0 %v1601
  %v1663 = vpop.f32.mrb[0].mxu0
  %v1664 = vadd.f32 0.0, %v1663
  %v1665 = vpop.f32.mrb[0].mxu0
  %v1666 = vpop.f32.mrb[0].mxu0
  %v1667 = vadd.f32 0.0, %v1666
  %v1668 = vpop.f32.mrb[0].mxu0
  %1669 = vmatprep.mubr.bf16.mxu0 0
  %1670 = vmatmul.mubr.bf16.gmra.mrb[0].mxu0 %v1604
  %v1671 = vpop.f32.mrb[0].mxu0
  %v1672 = vadd.f32 0.0, %v1671
  %v1673 = vpop.f32.mrb[0].mxu0
  %v1674 = vpop.f32.mrb[0].mxu0
  %v1675 = vadd.f32 0.0, %v1674
  %v1676 = vpop.f32.mrb[0].mxu0
  %1677 = vmatprep.mubr.bf16.mxu0 0
  %1678 = vmatmul.mubr.bf16.gmra.mrb[0].mxu0 %v1607
  %v1679 = vpop.f32.mrb[0].mxu0
  %v1680 = vadd.f32 0.0, %v1679
  %v1681 = vpop.f32.mrb[0].mxu0
  %v1682 = vpop.f32.mrb[0].mxu0
  %v1683 = vadd.f32 0.0, %v1682
  %v1684 = vpop.f32.mrb[0].mxu0
  %1685 = vmatprep.mubr.bf16.mxu0 0
  %1686 = vmatmul.mubr.bf16.gmra.mrb[0].mxu0 %v1610
  %v1687 = vpop.f32.mrb[0].mxu0
  %v1688 = vadd.f32 0.0, %v1687
  %v1689 = vpop.f32.mrb[0].mxu0
  %v1690 = vpop.f32.mrb[0].mxu0
  %v1691 = vadd.f32 0.0, %v1690
  %v1692 = vpop.f32.mrb[0].mxu0
  %1693 = vmatprep.mubr.bf16.mxu0 0
  %1694 = vmatmul.mubr.bf16.gmra.mrb[0].mxu0 %v1613
  %v1695 = vpop.f32.mrb[0].mxu0
  %v1696 = vadd.f32 0.0, %v1695
  %v1697 = vpop.f32.mrb[0].mxu0
  %v1698 = vpop.f32.mrb[0].mxu0
  %v1699 = vadd.f32 0.0, %v1698
  %v1700 = vpop.f32.mrb[0].mxu0
  %1701 = vmatprep.mubr.bf16.mxu0 0
  %1702 = vmatmul.mubr.bf16.gmra.mrb[0].mxu0 %v1616
  %v1703 = vpop.f32.mrb[0].mxu0
  %v1704 = vadd.f32 0.0, %v1703
  %v1705 = vpop.f32.mrb[0].mxu0
  %v1706 = vpop.f32.mrb[0].mxu0
  %v1707 = vadd.f32 0.0, %v1706
  %v1708 = vpop.f32.mrb[0].mxu0
  %1709 = vmatprep.mubr.bf16.mxu0 0
  %1710 = vmatmul.mubr.bf16.gmra.mrb[0].mxu0 %v1619
  %v1711 = vpop.f32.mrb[0].mxu0
  %v1712 = vadd.f32 0.0, %v1711
  %v1713 = vpop.f32.mrb[0].mxu0
  %v1714 = vpop.f32.mrb[0].mxu0
  %v1715 = vadd.f32 0.0, %v1714
  %v1716 = vpop.f32.mrb[0].mxu0
  %1717 = vdwg.mxu0
  %v1718 = vadd.f32 %v1524, %v1656
  %v1719 = vadd.f32 %v1525, %v1659
  %v1720 = vadd.f32 %v1526, %v1664
  %v1721 = vadd.f32 %v1527, %v1667
  %v1722 = vadd.f32 %v1528, %v1672
  %v1723 = vadd.f32 %v1529, %v1675
  %v1724 = vadd.f32 %v1530, %v1680
  %v1725 = vadd.f32 %v1531, %v1683
  %v1726 = vadd.f32 %v1532, %v1688
  %v1727 = vadd.f32 %v1533, %v1691
  %v1728 = vadd.f32 %v1534, %v1696
  %v1729 = vadd.f32 %v1535, %v1699
  %v1730 = vadd.f32 %v1536, %v1704
  %v1731 = vadd.f32 %v1537, %v1707
  %v1732 = vadd.f32 %v1538, %v1712
  %v1733 = vadd.f32 %v1539, %v1715
  %v1734 = vld [vmem:[%s2] sm:$0x1]
  %v1736 = vlaneseq
  %v1737 = vshrl.u32 %v1736, 7
  %v1738 = vsub.s32 0, %v1737
  %v1739 = vrot.slane %v1734, %v1738
  %v1741 = vadd.f32 %v1718, %v1739
  %v1742 = vadd.f32 %v1719, %v1739
  %v1743 = vadd.f32 %v1720, %v1739
  %v1744 = vadd.f32 %v1721, %v1739
  %v1745 = vadd.f32 %v1722, %v1739
  %v1746 = vadd.f32 %v1723, %v1739
  %v1747 = vadd.f32 %v1724, %v1739
  %v1748 = vadd.f32 %v1725, %v1739
  %v1749 = vadd.f32 %v1726, %v1739
  %v1750 = vadd.f32 %v1727, %v1739
  %v1751 = vadd.f32 %v1728, %v1739
  %v1752 = vadd.f32 %v1729, %v1739
  %v1753 = vadd.f32 %v1730, %v1739
  %v1754 = vadd.f32 %v1731, %v1739
  %v1755 = vadd.f32 %v1732, %v1739
  %v1756 = vadd.f32 %v1733, %v1739
  %v1757 = vmax.f32 %v1741, 0.0
  %v1758 = vmax.f32 %v1742, 0.0
  %v1759 = vmax.f32 %v1743, 0.0
  %v1760 = vmax.f32 %v1744, 0.0
  %v1761 = vmax.f32 %v1745, 0.0
  %v1762 = vmax.f32 %v1746, 0.0
  %v1763 = vmax.f32 %v1747, 0.0
  %v1764 = vmax.f32 %v1748, 0.0
  %v1765 = vmax.f32 %v1749, 0.0
  %v1766 = vmax.f32 %v1750, 0.0
  %v1767 = vmax.f32 %v1751, 0.0
  %v1768 = vmax.f32 %v1752, 0.0
  %v1769 = vmax.f32 %v1753, 0.0
  %v1770 = vmax.f32 %v1754, 0.0
  %v1771 = vmax.f32 %v1755, 0.0
  %v1772 = vmax.f32 %v1756, 0.0
  %1773 = vst [vmem:[%s3] sm:$0xff] %v1757
  %1774 = vst [vmem:[%s3 + $0x8] sm:$0xff] %v1758
  %1775 = vst [vmem:[%s3 + $0x10] sm:$0xff] %v1759
  %1776 = vst [vmem:[%s3 + $0x18] sm:$0xff] %v1760
  %1777 = vst [vmem:[%s3 + $0x20] sm:$0xff] %v1761
  %1778 = vst [vmem:[%s3 + $0x28] sm:$0xff] %v1762
  %1779 = vst [vmem:[%s3 + $0x30] sm:$0xff] %v1763
  %1780 = vst [vmem:[%s3 + $0x38] sm:$0xff] %v1764
  %1781 = vst [vmem:[%s3 + $0x40] sm:$0xff] %v1765
  %1782 = vst [vmem:[%s3 + $0x48] sm:$0xff] %v1766
  %1783 = vst [vmem:[%s3 + $0x50] sm:$0xff] %v1767
  %1784 = vst [vmem:[%s3 + $0x58] sm:$0xff] %v1768
  %1785 = vst [vmem:[%s3 + $0x60] sm:$0xff] %v1769
  %1786 = vst [vmem:[%s3 + $0x68] sm:$0xff] %v1770
  %1787 = vst [vmem:[%s3 + $0x70] sm:$0xff] %v1771
  %1788 = vst [vmem:[%s3 + $0x78] sm:$0xff] %v1772
  // Predicated region
  $region14: #{encoder_forward.7} parent=0 // pred_check
    _
  $region15: #{encoder_forward.7} parent=0 // pred_check_branch
    %1790 = sbr.rel (0) target = $region17
  $region16: #{encoder_forward.7} parent=0 // pred_region
    _
  $region17: #{encoder_forward.7} parent=0 // pred_fallthru
    _
  // Predicated region
  $region18: #{encoder_forward.7} parent=0 // pred_check
    _
  $region19: #{encoder_forward.7} parent=0 // pred_check_branch
    %1792 = sbr.rel (0) target = $region21
  $region20: #{encoder_forward.7} parent=0 // pred_region
    _
  $region21: #{encoder_forward.7} parent=0 // pred_fallthru
    _

// kernel: encoder_forward.6
$region0: #{encoder_forward.6}
  #allocation0 [shape = 'u32[]', space=smem, size = 0x4, offset = 0x4, fixed_abs, tag = 'smem constant byte address 0x4 - core index']
  #allocation1 [shape = 'u32[144,128]{1,0:T(1,128)}', space=vmem, size = 0x12000, scoped, tag = 'internal scratch']
  %s0 = inlined_call_operand.vmem [shape: f32[4,2,17,17,32], index: 0, kind: input, shape index: {}]
  %s1 = inlined_call_operand.vmem [shape: bf16[9,32,64], index: 1, kind: input, shape index: {}]
  %s2 = inlined_call_operand.vmem [shape: f32[1,64], index: 2, kind: input, shape index: {}]
  %s3 = inlined_call_operand.vmem [shape: f32[512,64], index: 3, kind: output, shape index: {}]
  %s4 = sld [smem:[#allocation0]]
  $region22: #{encoder_forward.6} parent=0
    _
  %s6 = ssub.s32 1, %s4
  %s7 = scalar_select 0, %s6, %s4
  // Predicated region
  $region2: #{encoder_forward.6} parent=0 // pred_check
    _
  $region3: #{encoder_forward.6} parent=0 // pred_check_branch
    %9 = sbr.rel (0) target = $region5
  $region4: #{encoder_forward.6} parent=0 // pred_region
    _
  $region5: #{encoder_forward.6} parent=0 // pred_fallthru
    _
  // Predicated region
  $region6: #{encoder_forward.6} parent=0 // pred_check
    _
  $region7: #{encoder_forward.6} parent=0 // pred_check_branch
    %11 = sbr.rel (0) target = $region9
  $region8: #{encoder_forward.6} parent=0 // pred_region
    _
  $region9: #{encoder_forward.6} parent=0 // pred_fallthru
    _
  // Predicated region
  $region10: #{encoder_forward.6} parent=0 // pred_check
    _
  $region11: #{encoder_forward.6} parent=0 // pred_check_branch
    %13 = sbr.rel (0) target = $region13
  $region12: #{encoder_forward.6} parent=0 // pred_region
    _
  $region13: #{encoder_forward.6} parent=0 // pred_fallthru
    _
  %v15 = vld [vmem:[%s0] sm:$0xff]
  %v16 = vld [vmem:[%s0 + $0x8] sm:$0xff]
  %v17 = vld [vmem:[%s0 + $0x18] sm:$0xff]
  %v18 = vld [vmem:[%s0 + $0x20] sm:$0xff]
  %v19 = vld [vmem:[%s0 + $0x30] sm:$0xff]
  %v20 = vld [vmem:[%s0 + $0x38] sm:$0xff]
  %v21 = vld [vmem:[%s0 + $0x48] sm:$0xff]
  %v22 = vld [vmem:[%s0 + $0x50] sm:$0xff]
  %v23 = vld [vmem:[%s0 + $0x60] sm:$0xff]
  %v24 = vld [vmem:[%s0 + $0x68] sm:$0xff]
  %v25 = vld [vmem:[%s0 + $0x78] sm:$0xff]
  %v26 = vld [vmem:[%s0 + $0x80] sm:$0xff]
  %v27 = vld [vmem:[%s0 + $0x90] sm:$0xff]
  %v28 = vld [vmem:[%s0 + $0x98] sm:$0xff]
  %v29 = vld [vmem:[%s0 + $0xa8] sm:$0xff]
  %v30 = vld [vmem:[%s0 + $0xb0] sm:$0xff]
  %v31 = vld [vmem:[%s0 + $0xc0] sm:$0xff]
  %v32 = vld [vmem:[%s0 + $0xc8] sm:$0xff]
  %v33 = vld [vmem:[%s0 + $0xd8] sm:$0xff]
  %v34 = vld [vmem:[%s0 + $0xe0] sm:$0xff]
  %v35 = vld [vmem:[%s0 + $0xf0] sm:$0xff]
  %v36 = vld [vmem:[%s0 + $0xf8] sm:$0xff]
  %v37 = vld [vmem:[%s0 + $0x108] sm:$0xff]
  %v38 = vld [vmem:[%s0 + $0x110] sm:$0xff]
  %v39 = vld [vmem:[%s0 + $0x120] sm:$0xff]
  %v40 = vld [vmem:[%s0 + $0x128] sm:$0xff]
  %v41 = vld [vmem:[%s0 + $0x138] sm:$0xff]
  %v42 = vld [vmem:[%s0 + $0x140] sm:$0xff]
  %v43 = vld [vmem:[%s0 + $0x150] sm:$0xff]
  %v44 = vld [vmem:[%s0 + $0x158] sm:$0xff]
  %v45 = vld [vmem:[%s0 + $0x168] sm:$0xff]
  %v46 = vld [vmem:[%s0 + $0x170] sm:$0xff]
  %v47 = vld [vmem:[%s0 + $0x198] sm:$0xff]
  %v48 = vld [vmem:[%s0 + $0x1a0] sm:$0xff]
  %v49 = vld [vmem:[%s0 + $0x1b0] sm:$0xff]
  %v50 = vld [vmem:[%s0 + $0x1b8] sm:$0xff]
  %v51 = vld [vmem:[%s0 + $0x1c8] sm:$0xff]
  %v52 = vld [vmem:[%s0 + $0x1d0] sm:$0xff]
  %v53 = vld [vmem:[%s0 + $0x1e0] sm:$0xff]
  %v54 = vld [vmem:[%s0 + $0x1e8] sm:$0xff]
  %v55 = vld [vmem:[%s0 + $0x1f8] sm:$0xff]
  %v56 = vld [vmem:[%s0 + $0x200] sm:$0xff]
  %v57 = vld [vmem:[%s0 + $0x210] sm:$0xff]
  %v58 = vld [vmem:[%s0 + $0x218] sm:$0xff]
  %v59 = vld [vmem:[%s0 + $0x228] sm:$0xff]
  %v60 = vld [vmem:[%s0 + $0x230] sm:$0xff]
  %v61 = vld [vmem:[%s0 + $0x240] sm:$0xff]
  %v62 = vld [vmem:[%s0 + $0x248] sm:$0xff]
  %v63 = vld [vmem:[%s0 + $0x258] sm:$0xff]
  %v64 = vld [vmem:[%s0 + $0x260] sm:$0xff]
  %v65 = vld [vmem:[%s0 + $0x270] sm:$0xff]
  %v66 = vld [vmem:[%s0 + $0x278] sm:$0xff]
  %v67 = vld [vmem:[%s0 + $0x288] sm:$0xff]
  %v68 = vld [vmem:[%s0 + $0x290] sm:$0xff]
  %v69 = vld [vmem:[%s0 + $0x2a0] sm:$0xff]
  %v70 = vld [vmem:[%s0 + $0x2a8] sm:$0xff]
  %v71 = vld [vmem:[%s0 + $0x2b8] sm:$0xff]
  %v72 = vld [vmem:[%s0 + $0x2c0] sm:$0xff]
  %v73 = vld [vmem:[%s0 + $0x2d0] sm:$0xff]
  %v74 = vld [vmem:[%s0 + $0x2d8] sm:$0xff]
  %v75 = vld [vmem:[%s0 + $0x2e8] sm:$0xff]
  %v76 = vld [vmem:[%s0 + $0x2f0] sm:$0xff]
  %v77 = vld [vmem:[%s0 + $0x300] sm:$0xff]
  %v78 = vld [vmem:[%s0 + $0x308] sm:$0xff]
  %v79 = vpack.c.bf16 %v16, %v15
  %v80 = vpack.c.bf16 %v18, %v17
  %v81 = vpack.c.bf16 %v20, %v19
  %v82 = vpack.c.bf16 %v22, %v21
  %v83 = vpack.c.bf16 %v24, %v23
  %v84 = vpack.c.bf16 %v26, %v25
  %v85 = vpack.c.bf16 %v28, %v27
  %v86 = vpack.c.bf16 %v30, %v29
  %v87 = vpack.c.bf16 %v32, %v31
  %v88 = vpack.c.bf16 %v34, %v33
  %v89 = vpack.c.bf16 %v36, %v35
  %v90 = vpack.c.bf16 %v38, %v37
  %v91 = vpack.c.bf16 %v40, %v39
  %v92 = vpack.c.bf16 %v42, %v41
  %v93 = vpack.c.bf16 %v44, %v43
  %v94 = vpack.c.bf16 %v46, %v45
  %v95 = vpack.c.bf16 %v48, %v47
  %v96 = vpack.c.bf16 %v50, %v49
  %v97 = vpack.c.bf16 %v52, %v51
  %v98 = vpack.c.bf16 %v54, %v53
  %v99 = vpack.c.bf16 %v56, %v55
  %v100 = vpack.c.bf16 %v58, %v57
  %v101 = vpack.c.bf16 %v60, %v59
  %v102 = vpack.c.bf16 %v62, %v61
  %v103 = vpack.c.bf16 %v64, %v63
  %v104 = vpack.c.bf16 %v66, %v65
  %v105 = vpack.c.bf16 %v68, %v67
  %v106 = vpack.c.bf16 %v70, %v69
  %v107 = vpack.c.bf16 %v72, %v71
  %v108 = vpack.c.bf16 %v74, %v73
  %v109 = vpack.c.bf16 %v76, %v75
  %v110 = vpack.c.bf16 %v78, %v77
  %v111 = vld [vmem:[%s1] sm:$0xf]
  %v112 = vld [vmem:[%s1 + $0x4] sm:$0xf]
  %v113 = vld [vmem:[%s1 + $0x8] sm:$0xf]
  %v114 = vld [vmem:[%s1 + $0xc] sm:$0xf]
  %s115 = scalar_lea.vmem %s0, 816
  %v116 = vld [vmem:[%s115] sm:$0xff]
  %v117 = vld [vmem:[%s115 + $0x8] sm:$0xff]
  %v118 = vld [vmem:[%s115 + $0x18] sm:$0xff]
  %v119 = vld [vmem:[%s115 + $0x20] sm:$0xff]
  %v120 = vld [vmem:[%s115 + $0x30] sm:$0xff]
  %v121 = vld [vmem:[%s115 + $0x38] sm:$0xff]
  %v122 = vld [vmem:[%s115 + $0x48] sm:$0xff]
  %v123 = vld [vmem:[%s115 + $0x50] sm:$0xff]
  %v124 = vld [vmem:[%s115 + $0x60] sm:$0xff]
  %v125 = vld [vmem:[%s115 + $0x68] sm:$0xff]
  %v126 = vld [vmem:[%s115 + $0x78] sm:$0xff]
  %v127 = vld [vmem:[%s115 + $0x80] sm:$0xff]
  %v128 = vld [vmem:[%s115 + $0x90] sm:$0xff]
  %v129 = vld [vmem:[%s115 + $0x98] sm:$0xff]
  %v130 = vld [vmem:[%s115 + $0xa8] sm:$0xff]
  %v131 = vld [vmem:[%s115 + $0xb0] sm:$0xff]
  %v132 = vld [vmem:[%s115 + $0xc0] sm:$0xff]
  %v133 = vld [vmem:[%s115 + $0xc8] sm:$0xff]
  %v134 = vld [vmem:[%s115 + $0xd8] sm:$0xff]
  %v135 = vld [vmem:[%s115 + $0xe0] sm:$0xff]
  %v136 = vld [vmem:[%s115 + $0xf0] sm:$0xff]
  %v137 = vld [vmem:[%s115 + $0xf8] sm:$0xff]
  %v138 = vld [vmem:[%s115 + $0x108] sm:$0xff]
  %v139 = vld [vmem:[%s115 + $0x110] sm:$0xff]
  %v140 = vld [vmem:[%s115 + $0x120] sm:$0xff]
  %v141 = vld [vmem:[%s115 + $0x128] sm:$0xff]
  %v142 = vld [vmem:[%s115 + $0x138] sm:$0xff]
  %v143 = vld [vmem:[%s115 + $0x140] sm:$0xff]
  %v144 = vld [vmem:[%s115 + $0x150] sm:$0xff]
  %v145 = vld [vmem:[%s115 + $0x158] sm:$0xff]
  %v146 = vld [vmem:[%s115 + $0x168] sm:$0xff]
  %v147 = vld [vmem:[%s115 + $0x170] sm:$0xff]
  %v148 = vld [vmem:[%s115 + $0x198] sm:$0xff]
  %v149 = vld [vmem:[%s115 + $0x1a0] sm:$0xff]
  %v150 = vld [vmem:[%s115 + $0x1b0] sm:$0xff]
  %v151 = vld [vmem:[%s115 + $0x1b8] sm:$0xff]
  %v152 = vld [vmem:[%s115 + $0x1c8] sm:$0xff]
  %v153 = vld [vmem:[%s115 + $0x1d0] sm:$0xff]
  %v154 = vld [vmem:[%s115 + $0x1e0] sm:$0xff]
  %v155 = vld [vmem:[%s115 + $0x1e8] sm:$0xff]
  %v156 = vld [vmem:[%s115 + $0x1f8] sm:$0xff]
  %v157 = vld [vmem:[%s115 + $0x200] sm:$0xff]
  %v158 = vld [vmem:[%s115 + $0x210] sm:$0xff]
  %v159 = vld [vmem:[%s115 + $0x218] sm:$0xff]
  %v160 = vld [vmem:[%s115 + $0x228] sm:$0xff]
  %v161 = vld [vmem:[%s115 + $0x230] sm:$0xff]
  %v162 = vld [vmem:[%s115 + $0x240] sm:$0xff]
  %v163 = vld [vmem:[%s115 + $0x248] sm:$0xff]
  %v164 = vld [vmem:[%s115 + $0x258] sm:$0xff]
  %v165 = vld [vmem:[%s115 + $0x260] sm:$0xff]
  %v166 = vld [vmem:[%s115 + $0x270] sm:$0xff]
  %v167 = vld [vmem:[%s115 + $0x278] sm:$0xff]
  %v168 = vld [vmem:[%s115 + $0x288] sm:$0xff]
  %v169 = vld [vmem:[%s115 + $0x290] sm:$0xff]
  %v170 = vld [vmem:[%s115 + $0x2a0] sm:$0xff]
  %v171 = vld [vmem:[%s115 + $0x2a8] sm:$0xff]
  %v172 = vld [vmem:[%s115 + $0x2b8] sm:$0xff]
  %v173 = vld [vmem:[%s115 + $0x2c0] sm:$0xff]
  %v174 = vld [vmem:[%s115 + $0x2d0] sm:$0xff]
  %v175 = vld [vmem:[%s115 + $0x2d8] sm:$0xff]
  %v176 = vld [vmem:[%s115 + $0x2e8] sm:$0xff]
  %v177 = vld [vmem:[%s115 + $0x2f0] sm:$0xff]
  %v178 = vld [vmem:[%s115 + $0x300] sm:$0xff]
  %v179 = vld [vmem:[%s115 + $0x308] sm:$0xff]
  %v180 = vpack.c.bf16 %v117, %v116
  %v181 = vpack.c.bf16 %v119, %v118
  %v182 = vpack.c.bf16 %v121, %v120
  %v183 = vpack.c.bf16 %v123, %v122
  %v184 = vpack.c.bf16 %v125, %v124
  %v185 = vpack.c.bf16 %v127, %v126
  %v186 = vpack.c.bf16 %v129, %v128
  %v187 = vpack.c.bf16 %v131, %v130
  %v188 = vpack.c.bf16 %v133, %v132
  %v189 = vpack.c.bf16 %v135, %v134
  %v190 = vpack.c.bf16 %v137, %v136
  %v191 = vpack.c.bf16 %v139, %v138
  %v192 = vpack.c.bf16 %v141, %v140
  %v193 = vpack.c.bf16 %v143, %v142
  %v194 = vpack.c.bf16 %v145, %v144
  %v195 = vpack.c.bf16 %v147, %v146
  %v196 = vpack.c.bf16 %v149, %v148
  %v197 = vpack.c.bf16 %v151, %v150
  %v198 = vpack.c.bf16 %v153, %v152
  %v199 = vpack.c.bf16 %v155, %v154
  %v200 = vpack.c.bf16 %v157, %v156
  %v201 = vpack.c.bf16 %v159, %v158
  %v202 = vpack.c.bf16 %v161, %v160
  %v203 = vpack.c.bf16 %v163, %v162
  %v204 = vpack.c.bf16 %v165, %v164
  %v205 = vpack.c.bf16 %v167, %v166
  %v206 = vpack.c.bf16 %v169, %v168
  %v207 = vpack.c.bf16 %v171, %v170
  %v208 = vpack.c.bf16 %v173, %v172
  %v209 = vpack.c.bf16 %v175, %v174
  %v210 = vpack.c.bf16 %v177, %v176
  %v211 = vpack.c.bf16 %v179, %v178
  %s212 = scalar_lea.vmem %s1, 16
  %v213 = vld [vmem:[%s212] sm:$0xf]
  %v214 = vld [vmem:[%s212 + $0x4] sm:$0xf]
  %v215 = vld [vmem:[%s212 + $0x8] sm:$0xf]
  %v216 = vld [vmem:[%s212 + $0xc] sm:$0xf]
  %v221 = vunpack.c.l.b16 %v213
  %v222 = vunpack.c.l.b16 %v214
  %v223 = vunpack.c.l.b16 %v215
  %v224 = vunpack.c.l.b16 %v216
  %v225 = vpack.c.b16 %v222, %v221
  %v226 = vpack.c.b16 %v224, %v223
  %vm229 = vcmask 261120
  %v231 = vsel %vm229, %v180, 0
  %v234 = vsel %vm229, %v181, 0
  %v237 = vsel %vm229, %v182, 0
  %v240 = vsel %vm229, %v183, 0
  %v243 = vsel %vm229, %v184, 0
  %v246 = vsel %vm229, %v185, 0
  %v249 = vsel %vm229, %v186, 0
  %v252 = vsel %vm229, %v187, 0
  %v255 = vsel %vm229, %v188, 0
  %v258 = vsel %vm229, %v189, 0
  %v261 = vsel %vm229, %v190, 0
  %v264 = vsel %vm229, %v191, 0
  %v267 = vsel %vm229, %v192, 0
  %v270 = vsel %vm229, %v193, 0
  %v273 = vsel %vm229, %v194, 0
  %v276 = vsel %vm229, %v195, 0
  %v279 = vsel %vm229, %v196, 0
  %v282 = vsel %vm229, %v197, 0
  %v285 = vsel %vm229, %v198, 0
  %v288 = vsel %vm229, %v199, 0
  %v291 = vsel %vm229, %v200, 0
  %v294 = vsel %vm229, %v201, 0
  %v297 = vsel %vm229, %v202, 0
  %v300 = vsel %vm229, %v203, 0
  %v303 = vsel %vm229, %v204, 0
  %v306 = vsel %vm229, %v205, 0
  %v309 = vsel %vm229, %v206, 0
  %v312 = vsel %vm229, %v207, 0
  %v315 = vsel %vm229, %v208, 0
  %v318 = vsel %vm229, %v209, 0
  %v321 = vsel %vm229, %v210, 0
  %v324 = vsel %vm229, %v211, 0
  %326 = vmatprep.subr.bf16.mxu0 0
  %327 = vmatpush1.bf16.msra.mxu0 %v225
  %328 = vmatprep.subr.bf16.mxu0 0
  %329 = vmatpush1.bf16.msra.mxu0 %v226
  %330 = vmatprep.subr.bf16.mxu0 0
  %331 = vmatpush1.bf16.msra.mxu0 0
  %332 = vmatprep.subr.bf16.mxu0 0
  %333 = vmatpush1.bf16.msra.mxu0 0
  %334 = vmatprep.subr.bf16.mxu0 0
  %335 = vmatpush1.bf16.msra.mxu0 0
  %336 = vmatprep.subr.bf16.mxu0 0
  %337 = vmatpush1.bf16.msra.mxu0 0
  %338 = vmatprep.subr.bf16.mxu0 0
  %339 = vmatpush1.bf16.msra.mxu0 0
  %340 = vmatprep.subr.bf16.mxu0 0
  %341 = vmatpush1.bf16.msra.mxu0 0
  %342 = vmatprep.subr.bf16.mxu0 0
  %343 = vmatpush1.bf16.msra.mxu0 0
  %344 = vmatprep.subr.bf16.mxu0 0
  %345 = vmatpush1.bf16.msra.mxu0 0
  %346 = vmatprep.subr.bf16.mxu0 0
  %347 = vmatpush1.bf16.msra.mxu0 0
  %348 = vmatprep.subr.bf16.mxu0 0
  %349 = vmatpush1.bf16.msra.mxu0 0
  %350 = vmatprep.subr.bf16.mxu0 0
  %351 = vmatpush1.bf16.msra.mxu0 0
  %352 = vmatprep.subr.bf16.mxu0 0
  %353 = vmatpush1.bf16.msra.mxu0 0
  %354 = vmatprep.subr.bf16.mxu0 0
  %355 = vmatpush1.bf16.msra.mxu0 0
  %356 = vmatprep.subr.bf16.mxu0 0
  %357 = vmatpush1.bf16.msra.mxu0 0
  %358 = vmatprep.mubr.bf16.mxu0 0
  %359 = vmatmul.mubr.bf16.gmra.mrb[0].mxu0 %v231
  %v360 = vpop.f32.mrb[0].mxu0
  %v361 = vadd.f32 0.0, %v360
  %v362 = vpop.f32.mrb[0].mxu0
  %v363 = vpop.f32.mrb[0].mxu0
  %v364 = vadd.f32 0.0, %v363
  %v365 = vpop.f32.mrb[0].mxu0
  %366 = vmatprep.mubr.bf16.mxu0 0
  %367 = vmatmul.mubr.bf16.gmra.mrb[0].mxu0 %v234
  %v368 = vpop.f32.mrb[0].mxu0
  %v369 = vadd.f32 0.0, %v368
  %v370 = vpop.f32.mrb[0].mxu0
  %v371 = vpop.f32.mrb[0].mxu0
  %v372 = vadd.f32 0.0, %v371
  %v373 = vpop.f32.mrb[0].mxu0
  %374 = vmatprep.mubr.bf16.mxu0 0
  %375 = vmatmul.mubr.bf16.gmra.mrb[0].mxu0 %v237
  %v376 = vpop.f32.mrb[0].mxu0
  %v377 = vadd.f32 0.0, %v376
  %v378 = vpop.f32.mrb[0].mxu0
  %v379 = vpop.f32.mrb[0].mxu0
  %v380 = vadd.f32 0.0, %v379
  %v381 = vpop.f32.mrb[0].mxu0
  %382 = vmatprep.mubr.bf16.mxu0 0
  %383 = vmatmul.mubr.bf16.gmra.mrb[0].mxu0 %v240
  %v384 = vpop.f32.mrb[0].mxu0
  %v385 = vadd.f32 0.0, %v384
  %v386 = vpop.f32.mrb[0].mxu0
  %v387 = vpop.f32.mrb[0].mxu0
  %v388 = vadd.f32 0.0, %v387
  %v389 = vpop.f32.mrb[0].mxu0
  %390 = vmatprep.mubr.bf16.mxu0 0
  %391 = vmatmul.mubr.bf16.gmra.mrb[0].mxu0 %v243
  %v392 = vpop.f32.mrb[0].mxu0
  %v393 = vadd.f32 0.0, %v392
  %v394 = vpop.f32.mrb[0].mxu0
  %v395 = vpop.f32.mrb[0].mxu0
  %v396 = vadd.f32 0.0, %v395
  %v397 = vpop.f32.mrb[0].mxu0
  %398 = vmatprep.mubr.bf16.mxu0 0
  %399 = vmatmul.mubr.bf16.gmra.mrb[0].mxu0 %v246
  %v400 = vpop.f32.mrb[0].mxu0
  %v401 = vadd.f32 0.0, %v400
  %v402 = vpop.f32.mrb[0].mxu0
  %v403 = vpop.f32.mrb[0].mxu0
  %v404 = vadd.f32 0.0, %v403
  %v405 = vpop.f32.mrb[0].mxu0
  %406 = vmatprep.mubr.bf16.mxu0 0
  %407 = vmatmul.mubr.bf16.gmra.mrb[0].mxu0 %v249
  %v408 = vpop.f32.mrb[0].mxu0
  %v409 = vadd.f32 0.0, %v408
  %v410 = vpop.f32.mrb[0].mxu0
  %v411 = vpop.f32.mrb[0].mxu0
  %v412 = vadd.f32 0.0, %v411
  %v413 = vpop.f32.mrb[0].mxu0
  %414 = vmatprep.mubr.bf16.mxu0 0
  %415 = vmatmul.mubr.bf16.gmra.mrb[0].mxu0 %v252
  %v416 = vpop.f32.mrb[0].mxu0
  %v417 = vadd.f32 0.0, %v416
  %v418 = vpop.f32.mrb[0].mxu0
  %v419 = vpop.f32.mrb[0].mxu0
  %v420 = vadd.f32 0.0, %v419
  %v421 = vpop.f32.mrb[0].mxu0
  %422 = vmatprep.mubr.bf16.mxu0 0
  %423 = vmatmul.mubr.bf16.gmra.mrb[0].mxu0 %v255
  %v424 = vpop.f32.mrb[0].mxu0
  %v425 = vadd.f32 0.0, %v424
  %v426 = vpop.f32.mrb[0].mxu0
  %v427 = vpop.f32.mrb[0].mxu0
  %v428 = vadd.f32 0.0, %v427
  %v429 = vpop.f32.mrb[0].mxu0
  %430 = vmatprep.mubr.bf16.mxu0 0
  %431 = vmatmul.mubr.bf16.gmra.mrb[0].mxu0 %v258
  %v432 = vpop.f32.mrb[0].mxu0
  %v433 = vadd.f32 0.0, %v432
  %v434 = vpop.f32.mrb[0].mxu0
  %v435 = vpop.f32.mrb[0].mxu0
  %v436 = vadd.f32 0.0, %v435
  %v437 = vpop.f32.mrb[0].mxu0
  %438 = vmatprep.mubr.bf16.mxu0 0
  %439 = vmatmul.mubr.bf16.gmra.mrb[0].mxu0 %v261
  %v440 = vpop.f32.mrb[0].mxu0
  %v441 = vadd.f32 0.0, %v440
  %v442 = vpop.f32.mrb[0].mxu0
  %v443 = vpop.f32.mrb[0].mxu0
  %v444 = vadd.f32 0.0, %v443
  %v445 = vpop.f32.mrb[0].mxu0
  %446 = vmatprep.mubr.bf16.mxu0 0
  %447 = vmatmul.mubr.bf16.gmra.mrb[0].mxu0 %v264
  %v448 = vpop.f32.mrb[0].mxu0
  %v449 = vadd.f32 0.0, %v448
  %v450 = vpop.f32.mrb[0].mxu0
  %v451 = vpop.f32.mrb[0].mxu0
  %v452 = vadd.f32 0.0, %v451
  %v453 = vpop.f32.mrb[0].mxu0
  %454 = vmatprep.mubr.bf16.mxu0 0
  %455 = vmatmul.mubr.bf16.gmra.mrb[0].mxu0 %v267
  %v456 = vpop.f32.mrb[0].mxu0
  %v457 = vadd.f32 0.0, %v456
  %v458 = vpop.f32.mrb[0].mxu0
  %v459 = vpop.f32.mrb[0].mxu0
  %v460 = vadd.f32 0.0, %v459
  %v461 = vpop.f32.mrb[0].mxu0
  %462 = vmatprep.mubr.bf16.mxu0 0
  %463 = vmatmul.mubr.bf16.gmra.mrb[0].mxu0 %v270
  %v464 = vpop.f32.mrb[0].mxu0
  %v465 = vadd.f32 0.0, %v464
  %v466 = vpop.f32.mrb[0].mxu0
  %v467 = vpop.f32.mrb[0].mxu0
  %v468 = vadd.f32 0.0, %v467
  %v469 = vpop.f32.mrb[0].mxu0
  %470 = vmatprep.mubr.bf16.mxu0 0
  %471 = vmatmul.mubr.bf16.gmra.mrb[0].mxu0 %v273
  %v472 = vpop.f32.mrb[0].mxu0
  %v473 = vadd.f32 0.0, %v472
  %v474 = vpop.f32.mrb[0].mxu0
  %v475 = vpop.f32.mrb[0].mxu0
  %v476 = vadd.f32 0.0, %v475
  %v477 = vpop.f32.mrb[0].mxu0
  %478 = vmatprep.mubr.bf16.mxu0 0
  %479 = vmatmul.mubr.bf16.gmra.mrb[0].mxu0 %v276
  %v480 = vpop.f32.mrb[0].mxu0
  %v481 = vadd.f32 0.0, %v480
  %v482 = vpop.f32.mrb[0].mxu0
  %v483 = vpop.f32.mrb[0].mxu0
  %v484 = vadd.f32 0.0, %v483
  %v485 = vpop.f32.mrb[0].mxu0
  %486 = vmatprep.mubr.bf16.mxu0 0
  %487 = vmatmul.mubr.bf16.gmra.mrb[0].mxu0 %v279
  %v488 = vpop.f32.mrb[0].mxu0
  %v489 = vadd.f32 0.0, %v488
  %v490 = vpop.f32.mrb[0].mxu0
  %v491 = vpop.f32.mrb[0].mxu0
  %v492 = vadd.f32 0.0, %v491
  %v493 = vpop.f32.mrb[0].mxu0
  %494 = vmatprep.mubr.bf16.mxu0 0
  %495 = vmatmul.mubr.bf16.gmra.mrb[0].mxu0 %v282
  %v496 = vpop.f32.mrb[0].mxu0
  %v497 = vadd.f32 0.0, %v496
  %v498 = vpop.f32.mrb[0].mxu0
  %v499 = vpop.f32.mrb[0].mxu0
  %v500 = vadd.f32 0.0, %v499
  %v501 = vpop.f32.mrb[0].mxu0
  %502 = vmatprep.mubr.bf16.mxu0 0
  %503 = vmatmul.mubr.bf16.gmra.mrb[0].mxu0 %v285
  %v504 = vpop.f32.mrb[0].mxu0
  %v505 = vadd.f32 0.0, %v504
  %v506 = vpop.f32.mrb[0].mxu0
  %v507 = vpop.f32.mrb[0].mxu0
  %v508 = vadd.f32 0.0, %v507
  %v509 = vpop.f32.mrb[0].mxu0
  %510 = vmatprep.mubr.bf16.mxu0 0
  %511 = vmatmul.mubr.bf16.gmra.mrb[0].mxu0 %v288
  %v512 = vpop.f32.mrb[0].mxu0
  %v513 = vadd.f32 0.0, %v512
  %v514 = vpop.f32.mrb[0].mxu0
  %v515 = vpop.f32.mrb[0].mxu0
  %v516 = vadd.f32 0.0, %v515
  %v517 = vpop.f32.mrb[0].mxu0
  %518 = vmatprep.mubr.bf16.mxu0 0
  %519 = vmatmul.mubr.bf16.gmra.mrb[0].mxu0 %v291
  %v520 = vpop.f32.mrb[0].mxu0
  %v521 = vadd.f32 0.0, %v520
  %v522 = vpop.f32.mrb[0].mxu0
  %v523 = vpop.f32.mrb[0].mxu0
  %v524 = vadd.f32 0.0, %v523
  %v525 = vpop.f32.mrb[0].mxu0
  %526 = vmatprep.mubr.bf16.mxu0 0
  %527 = vmatmul.mubr.bf16.gmra.mrb[0].mxu0 %v294
  %v528 = vpop.f32.mrb[0].mxu0
  %v529 = vadd.f32 0.0, %v528
  %v530 = vpop.f32.mrb[0].mxu0
  %v531 = vpop.f32.mrb[0].mxu0
  %v532 = vadd.f32 0.0, %v531
  %v533 = vpop.f32.mrb[0].mxu0
  %534 = vmatprep.mubr.bf16.mxu0 0
  %535 = vmatmul.mubr.bf16.gmra.mrb[0].mxu0 %v297
  %v536 = vpop.f32.mrb[0].mxu0
  %v537 = vadd.f32 0.0, %v536
  %v538 = vpop.f32.mrb[0].mxu0
  %v539 = vpop.f32.mrb[0].mxu0
  %v540 = vadd.f32 0.0, %v539
  %v541 = vpop.f32.mrb[0].mxu0
  %542 = vmatprep.mubr.bf16.mxu0 0
  %543 = vmatmul.mubr.bf16.gmra.mrb[0].mxu0 %v300
  %v544 = vpop.f32.mrb[0].mxu0
  %v545 = vadd.f32 0.0, %v544
  %v546 = vpop.f32.mrb[0].mxu0
  %v547 = vpop.f32.mrb[0].mxu0
  %v548 = vadd.f32 0.0, %v547
  %v549 = vpop.f32.mrb[0].mxu0
  %550 = vmatprep.mubr.bf16.mxu0 0
  %551 = vmatmul.mubr.bf16.gmra.mrb[0].mxu0 %v303
  %v552 = vpop.f32.mrb[0].mxu0
  %v553 = vadd.f32 0.0, %v552
  %v554 = vpop.f32.mrb[0].mxu0
  %v555 = vpop.f32.mrb[0].mxu0
  %v556 = vadd.f32 0.0, %v555
  %v557 = vpop.f32.mrb[0].mxu0
  %558 = vmatprep.mubr.bf16.mxu0 0
  %559 = vmatmul.mubr.bf16.gmra.mrb[0].mxu0 %v306
  %v560 = vpop.f32.mrb[0].mxu0
  %v561 = vadd.f32 0.0, %v560
  %v562 = vpop.f32.mrb[0].mxu0
  %v563 = vpop.f32.mrb[0].mxu0
  %v564 = vadd.f32 0.0, %v563
  %v565 = vpop.f32.mrb[0].mxu0
  %566 = vmatprep.mubr.bf16.mxu0 0
  %567 = vmatmul.mubr.bf16.gmra.mrb[0].mxu0 %v309
  %v568 = vpop.f32.mrb[0].mxu0
  %v569 = vadd.f32 0.0, %v568
  %v570 = vpop.f32.mrb[0].mxu0
  %v571 = vpop.f32.mrb[0].mxu0
  %v572 = vadd.f32 0.0, %v571
  %v573 = vpop.f32.mrb[0].mxu0
  %574 = vmatprep.mubr.bf16.mxu0 0
  %575 = vmatmul.mubr.bf16.gmra.mrb[0].mxu0 %v312
  %v576 = vpop.f32.mrb[0].mxu0
  %v577 = vadd.f32 0.0, %v576
  %v578 = vpop.f32.mrb[0].mxu0
  %v579 = vpop.f32.mrb[0].mxu0
  %v580 = vadd.f32 0.0, %v579
  %v581 = vpop.f32.mrb[0].mxu0
  %582 = vmatprep.mubr.bf16.mxu0 0
  %583 = vmatmul.mubr.bf16.gmra.mrb[0].mxu0 %v315
  %v584 = vpop.f32.mrb[0].mxu0
  %v585 = vadd.f32 0.0, %v584
  %v586 = vpop.f32.mrb[0].mxu0
  %v587 = vpop.f32.mrb[0].mxu0
  %v588 = vadd.f32 0.0, %v587
  %v589 = vpop.f32.mrb[0].mxu0
  %590 = vmatprep.mubr.bf16.mxu0 0
  %591 = vmatmul.mubr.bf16.gmra.mrb[0].mxu0 %v318
  %v592 = vpop.f32.mrb[0].mxu0
  %v593 = vadd.f32 0.0, %v592
  %v594 = vpop.f32.mrb[0].mxu0
  %v595 = vpop.f32.mrb[0].mxu0
  %v596 = vadd.f32 0.0, %v595
  %v597 = vpop.f32.mrb[0].mxu0
  %598 = vmatprep.mubr.bf16.mxu0 0
  %599 = vmatmul.mubr.bf16.gmra.mrb[0].mxu0 %v321
  %v600 = vpop.f32.mrb[0].mxu0
  %v601 = vadd.f32 0.0, %v600
  %v602 = vpop.f32.mrb[0].mxu0
  %v603 = vpop.f32.mrb[0].mxu0
  %v604 = vadd.f32 0.0, %v603
  %v605 = vpop.f32.mrb[0].mxu0
  %606 = vmatprep.mubr.bf16.mxu0 0
  %607 = vmatmul.mubr.bf16.gmra.mrb[0].mxu0 %v324
  %v608 = vpop.f32.mrb[0].mxu0
  %v609 = vadd.f32 0.0, %v608
  %v610 = vpop.f32.mrb[0].mxu0
  %v611 = vpop.f32.mrb[0].mxu0
  %v612 = vadd.f32 0.0, %v611
  %v613 = vpop.f32.mrb[0].mxu0
  %614 = vdwg.mxu0
  %v619 = vunpack.c.l.b16 %v111
  %v620 = vunpack.c.l.b16 %v112
  %v621 = vunpack.c.l.b16 %v113
  %v622 = vunpack.c.l.b16 %v114
  %v623 = vpack.c.b16 %v620, %v619
  %v624 = vpack.c.b16 %v622, %v621
  %v628 = vsel %vm229, %v79, 0
  %v631 = vsel %vm229, %v80, 0
  %v634 = vsel %vm229, %v81, 0
  %v637 = vsel %vm229, %v82, 0
  %v640 = vsel %vm229, %v83, 0
  %v643 = vsel %vm229, %v84, 0
  %v646 = vsel %vm229, %v85, 0
  %v649 = vsel %vm229, %v86, 0
  %v652 = vsel %vm229, %v87, 0
  %v655 = vsel %vm229, %v88, 0
  %v658 = vsel %vm229, %v89, 0
  %v661 = vsel %vm229, %v90, 0
  %v664 = vsel %vm229, %v91, 0
  %v667 = vsel %vm229, %v92, 0
  %v670 = vsel %vm229, %v93, 0
  %v673 = vsel %vm229, %v94, 0
  %v676 = vsel %vm229, %v95, 0
  %v679 = vsel %vm229, %v96, 0
  %v682 = vsel %vm229, %v97, 0
  %v685 = vsel %vm229, %v98, 0
  %v688 = vsel %vm229, %v99, 0
  %v691 = vsel %vm229, %v100, 0
  %v694 = vsel %vm229, %v101, 0
  %v697 = vsel %vm229, %v102, 0
  %v700 = vsel %vm229, %v103, 0
  %v703 = vsel %vm229, %v104, 0
  %v706 = vsel %vm229, %v105, 0
  %v709 = vsel %vm229, %v106, 0
  %v712 = vsel %vm229, %v107, 0
  %v715 = vsel %vm229, %v108, 0
  %v718 = vsel %vm229, %v109, 0
  %v721 = vsel %vm229, %v110, 0
  %723 = vmatprep.subr.bf16.mxu0 0
  %724 = vmatpush1.bf16.msra.mxu0 %v623
  %725 = vmatprep.subr.bf16.mxu0 0
  %726 = vmatpush1.bf16.msra.mxu0 %v624
  %727 = vmatprep.subr.bf16.mxu0 0
  %728 = vmatpush1.bf16.msra.mxu0 0
  %729 = vmatprep.subr.bf16.mxu0 0
  %730 = vmatpush1.bf16.msra.mxu0 0
  %731 = vmatprep.subr.bf16.mxu0 0
  %732 = vmatpush1.bf16.msra.mxu0 0
  %733 = vmatprep.subr.bf16.mxu0 0
  %734 = vmatpush1.bf16.msra.mxu0 0
  %735 = vmatprep.subr.bf16.mxu0 0
  %736 = vmatpush1.bf16.msra.mxu0 0
  %737 = vmatprep.subr.bf16.mxu0 0
  %738 = vmatpush1.bf16.msra.mxu0 0
  %739 = vmatprep.subr.bf16.mxu0 0
  %740 = vmatpush1.bf16.msra.mxu0 0
  %741 = vmatprep.subr.bf16.mxu0 0
  %742 = vmatpush1.bf16.msra.mxu0 0
  %743 = vmatprep.subr.bf16.mxu0 0
  %744 = vmatpush1.bf16.msra.mxu0 0
  %745 = vmatprep.subr.bf16.mxu0 0
  %746 = vmatpush1.bf16.msra.mxu0 0
  %747 = vmatprep.subr.bf16.mxu0 0
  %748 = vmatpush1.bf16.msra.mxu0 0
  %749 = vmatprep.subr.bf16.mxu0 0
  %750 = vmatpush1.bf16.msra.mxu0 0
  %751 = vmatprep.subr.bf16.mxu0 0
  %752 = vmatpush1.bf16.msra.mxu0 0
  %753 = vmatprep.subr.bf16.mxu0 0
  %754 = vmatpush1.bf16.msra.mxu0 0
  %755 = vmatprep.mubr.bf16.mxu0 0
  %756 = vmatmul.mubr.bf16.gmra.mrb[0].mxu0 %v628
  %v757 = vpop.f32.mrb[0].mxu0
  %v758 = vadd.f32 %v361, %v757
  %v759 = vpop.f32.mrb[0].mxu0
  %v760 = vpop.f32.mrb[0].mxu0
  %v761 = vadd.f32 %v364, %v760
  %v762 = vpop.f32.mrb[0].mxu0
  %763 = vmatprep.mubr.bf16.mxu0 0
  %764 = vmatmul.mubr.bf16.gmra.mrb[0].mxu0 %v631
  %v765 = vpop.f32.mrb[0].mxu0
  %v766 = vadd.f32 %v369, %v765
  %v767 = vpop.f32.mrb[0].mxu0
  %v768 = vpop.f32.mrb[0].mxu0
  %v769 = vadd.f32 %v372, %v768
  %v770 = vpop.f32.mrb[0].mxu0
  %771 = vmatprep.mubr.bf16.mxu0 0
  %772 = vmatmul.mubr.bf16.gmra.mrb[0].mxu0 %v634
  %v773 = vpop.f32.mrb[0].mxu0
  %v774 = vadd.f32 %v377, %v773
  %v775 = vpop.f32.mrb[0].mxu0
  %v776 = vpop.f32.mrb[0].mxu0
  %v777 = vadd.f32 %v380, %v776
  %v778 = vpop.f32.mrb[0].mxu0
  %779 = vmatprep.mubr.bf16.mxu0 0
  %780 = vmatmul.mubr.bf16.gmra.mrb[0].mxu0 %v637
  %v781 = vpop.f32.mrb[0].mxu0
  %v782 = vadd.f32 %v385, %v781
  %v783 = vpop.f32.mrb[0].mxu0
  %v784 = vpop.f32.mrb[0].mxu0
  %v785 = vadd.f32 %v388, %v784
  %v786 = vpop.f32.mrb[0].mxu0
  %787 = vmatprep.mubr.bf16.mxu0 0
  %788 = vmatmul.mubr.bf16.gmra.mrb[0].mxu0 %v640
  %v789 = vpop.f32.mrb[0].mxu0
  %v790 = vadd.f32 %v393, %v789
  %v791 = vpop.f32.mrb[0].mxu0
  %v792 = vpop.f32.mrb[0].mxu0
  %v793 = vadd.f32 %v396, %v792
  %v794 = vpop.f32.mrb[0].mxu0
  %795 = vmatprep.mubr.bf16.mxu0 0
  %796 = vmatmul.mubr.bf16.gmra.mrb[0].mxu0 %v643
  %v797 = vpop.f32.mrb[0].mxu0
  %v798 = vadd.f32 %v401, %v797
  %v799 = vpop.f32.mrb[0].mxu0
  %v800 = vpop.f32.mrb[0].mxu0
  %v801 = vadd.f32 %v404, %v800
  %v802 = vpop.f32.mrb[0].mxu0
  %803 = vmatprep.mubr.bf16.mxu0 0
  %804 = vmatmul.mubr.bf16.gmra.mrb[0].mxu0 %v646
  %v805 = vpop.f32.mrb[0].mxu0
  %v806 = vadd.f32 %v409, %v805
  %v807 = vpop.f32.mrb[0].mxu0
  %v808 = vpop.f32.mrb[0].mxu0
  %v809 = vadd.f32 %v412, %v808
  %v810 = vpop.f32.mrb[0].mxu0
  %811 = vmatprep.mubr.bf16.mxu0 0
  %812 = vmatmul.mubr.bf16.gmra.mrb[0].mxu0 %v649
  %v813 = vpop.f32.mrb[0].mxu0
  %v814 = vadd.f32 %v417, %v813
  %v815 = vpop.f32.mrb[0].mxu0
  %v816 = vpop.f32.mrb[0].mxu0
  %v817 = vadd.f32 %v420, %v816
  %v818 = vpop.f32.mrb[0].mxu0
  %819 = vmatprep.mubr.bf16.mxu0 0
  %820 = vmatmul.mubr.bf16.gmra.mrb[0].mxu0 %v652
  %v821 = vpop.f32.mrb[0].mxu0
  %v822 = vadd.f32 %v425, %v821
  %v823 = vpop.f32.mrb[0].mxu0
  %v824 = vpop.f32.mrb[0].mxu0
  %v825 = vadd.f32 %v428, %v824
  %v826 = vpop.f32.mrb[0].mxu0
  %827 = vmatprep.mubr.bf16.mxu0 0
  %828 = vmatmul.mubr.bf16.gmra.mrb[0].mxu0 %v655
  %v829 = vpop.f32.mrb[0].mxu0
  %v830 = vadd.f32 %v433, %v829
  %v831 = vpop.f32.mrb[0].mxu0
  %v832 = vpop.f32.mrb[0].mxu0
  %v833 = vadd.f32 %v436, %v832
  %v834 = vpop.f32.mrb[0].mxu0
  %835 = vmatprep.mubr.bf16.mxu0 0
  %836 = vmatmul.mubr.bf16.gmra.mrb[0].mxu0 %v658
  %v837 = vpop.f32.mrb[0].mxu0
  %v838 = vadd.f32 %v441, %v837
  %v839 = vpop.f32.mrb[0].mxu0
  %v840 = vpop.f32.mrb[0].mxu0
  %v841 = vadd.f32 %v444, %v840
  %v842 = vpop.f32.mrb[0].mxu0
  %843 = vmatprep.mubr.bf16.mxu0 0
  %844 = vmatmul.mubr.bf16.gmra.mrb[0].mxu0 %v661
  %v845 = vpop.f32.mrb[0].mxu0
  %v846 = vadd.f32 %v449, %v845
  %v847 = vpop.f32.mrb[0].mxu0
  %v848 = vpop.f32.mrb[0].mxu0
  %v849 = vadd.f32 %v452, %v848
  %v850 = vpop.f32.mrb[0].mxu0
  %851 = vmatprep.mubr.bf16.mxu0 0
  %852 = vmatmul.mubr.bf16.gmra.mrb[0].mxu0 %v664
  %v853 = vpop.f32.mrb[0].mxu0
  %v854 = vadd.f32 %v457, %v853
  %v855 = vpop.f32.mrb[0].mxu0
  %v856 = vpop.f32.mrb[0].mxu0
  %v857 = vadd.f32 %v460, %v856
  %v858 = vpop.f32.mrb[0].mxu0
  %859 = vmatprep.mubr.bf16.mxu0 0
  %860 = vmatmul.mubr.bf16.gmra.mrb[0].mxu0 %v667
  %v861 = vpop.f32.mrb[0].mxu0
  %v862 = vadd.f32 %v465, %v861
  %v863 = vpop.f32.mrb[0].mxu0
  %v864 = vpop.f32.mrb[0].mxu0
  %v865 = vadd.f32 %v468, %v864
  %v866 = vpop.f32.mrb[0].mxu0
  %867 = vmatprep.mubr.bf16.mxu0 0
  %868 = vmatmul.mubr.bf16.gmra.mrb[0].mxu0 %v670
  %v869 = vpop.f32.mrb[0].mxu0
  %v870 = vadd.f32 %v473, %v869
  %v871 = vpop.f32.mrb[0].mxu0
  %v872 = vpop.f32.mrb[0].mxu0
  %v873 = vadd.f32 %v476, %v872
  %v874 = vpop.f32.mrb[0].mxu0
  %875 = vmatprep.mubr.bf16.mxu0 0
  %876 = vmatmul.mubr.bf16.gmra.mrb[0].mxu0 %v673
  %v877 = vpop.f32.mrb[0].mxu0
  %v878 = vadd.f32 %v481, %v877
  %v879 = vpop.f32.mrb[0].mxu0
  %v880 = vpop.f32.mrb[0].mxu0
  %v881 = vadd.f32 %v484, %v880
  %v882 = vpop.f32.mrb[0].mxu0
  %883 = vmatprep.mubr.bf16.mxu0 0
  %884 = vmatmul.mubr.bf16.gmra.mrb[0].mxu0 %v676
  %v885 = vpop.f32.mrb[0].mxu0
  %v886 = vadd.f32 %v489, %v885
  %v887 = vpop.f32.mrb[0].mxu0
  %v888 = vpop.f32.mrb[0].mxu0
  %v889 = vadd.f32 %v492, %v888
  %v890 = vpop.f32.mrb[0].mxu0
  %891 = vmatprep.mubr.bf16.mxu0 0
  %892 = vmatmul.mubr.bf16.gmra.mrb[0].mxu0 %v679
  %v893 = vpop.f32.mrb[0].mxu0
  %v894 = vadd.f32 %v497, %v893
  %v895 = vpop.f32.mrb[0].mxu0
  %v896 = vpop.f32.mrb[0].mxu0
  %v897 = vadd.f32 %v500, %v896
  %v898 = vpop.f32.mrb[0].mxu0
  %899 = vmatprep.mubr.bf16.mxu0 0
  %900 = vmatmul.mubr.bf16.gmra.mrb[0].mxu0 %v682
  %v901 = vpop.f32.mrb[0].mxu0
  %v902 = vadd.f32 %v505, %v901
  %v903 = vpop.f32.mrb[0].mxu0
  %v904 = vpop.f32.mrb[0].mxu0
  %v905 = vadd.f32 %v508, %v904
  %v906 = vpop.f32.mrb[0].mxu0
  %907 = vmatprep.mubr.bf16.mxu0 0
  %908 = vmatmul.mubr.bf16.gmra.mrb[0].mxu0 %v685
  %v909 = vpop.f32.mrb[0].mxu0
  %v910 = vadd.f32 %v513, %v909
  %v911 = vpop.f32.mrb[0].mxu0
  %v912 = vpop.f32.mrb[0].mxu0
  %v913 = vadd.f32 %v516, %v912
  %v914 = vpop.f32.mrb[0].mxu0
  %915 = vmatprep.mubr.bf16.mxu0 0
  %916 = vmatmul.mubr.bf16.gmra.mrb[0].mxu0 %v688
  %v917 = vpop.f32.mrb[0].mxu0
  %v918 = vadd.f32 %v521, %v917
  %v919 = vpop.f32.mrb[0].mxu0
  %v920 = vpop.f32.mrb[0].mxu0
  %v921 = vadd.f32 %v524, %v920
  %v922 = vpop.f32.mrb[0].mxu0
  %923 = vmatprep.mubr.bf16.mxu0 0
  %924 = vmatmul.mubr.bf16.gmra.mrb[0].mxu0 %v691
  %v925 = vpop.f32.mrb[0].mxu0
  %v926 = vadd.f32 %v529, %v925
  %v927 = vpop.f32.mrb[0].mxu0
  %v928 = vpop.f32.mrb[0].mxu0
  %v929 = vadd.f32 %v532, %v928
  %v930 = vpop.f32.mrb[0].mxu0
  %931 = vmatprep.mubr.bf16.mxu0 0
  %932 = vmatmul.mubr.bf16.gmra.mrb[0].mxu0 %v694
  %v933 = vpop.f32.mrb[0].mxu0
  %v934 = vadd.f32 %v537, %v933
  %v935 = vpop.f32.mrb[0].mxu0
  %v936 = vpop.f32.mrb[0].mxu0
  %v937 = vadd.f32 %v540, %v936
  %v938 = vpop.f32.mrb[0].mxu0
  %939 = vmatprep.mubr.bf16.mxu0 0
  %940 = vmatmul.mubr.bf16.gmra.mrb[0].mxu0 %v697
  %v941 = vpop.f32.mrb[0].mxu0
  %v942 = vadd.f32 %v545, %v941
  %v943 = vpop.f32.mrb[0].mxu0
  %v944 = vpop.f32.mrb[0].mxu0
  %v945 = vadd.f32 %v548, %v944
  %v946 = vpop.f32.mrb[0].mxu0
  %947 = vmatprep.mubr.bf16.mxu0 0
  %948 = vmatmul.mubr.bf16.gmra.mrb[0].mxu0 %v700
  %v949 = vpop.f32.mrb[0].mxu0
  %v950 = vadd.f32 %v553, %v949
  %v951 = vpop.f32.mrb[0].mxu0
  %v952 = vpop.f32.mrb[0].mxu0
  %v953 = vadd.f32 %v556, %v952
  %v954 = vpop.f32.mrb[0].mxu0
  %955 = vmatprep.mubr.bf16.mxu0 0
  %956 = vmatmul.mubr.bf16.gmra.mrb[0].mxu0 %v703
  %v957 = vpop.f32.mrb[0].mxu0
  %v958 = vadd.f32 %v561, %v957
  %v959 = vpop.f32.mrb[0].mxu0
  %v960 = vpop.f32.mrb[0].mxu0
  %v961 = vadd.f32 %v564, %v960
  %v962 = vpop.f32.mrb[0].mxu0
  %963 = vmatprep.mubr.bf16.mxu0 0
  %964 = vmatmul.mubr.bf16.gmra.mrb[0].mxu0 %v706
  %v965 = vpop.f32.mrb[0].mxu0
  %v966 = vadd.f32 %v569, %v965
  %v967 = vpop.f32.mrb[0].mxu0
  %v968 = vpop.f32.mrb[0].mxu0
  %v969 = vadd.f32 %v572, %v968
  %v970 = vpop.f32.mrb[0].mxu0
  %971 = vmatprep.mubr.bf16.mxu0 0
  %972 = vmatmul.mubr.bf16.gmra.mrb[0].mxu0 %v709
  %v973 = vpop.f32.mrb[0].mxu0
  %v974 = vadd.f32 %v577, %v973
  %v975 = vpop.f32.mrb[0].mxu0
  %v976 = vpop.f32.mrb[0].mxu0
  %v977 = vadd.f32 %v580, %v976
  %v978 = vpop.f32.mrb[0].mxu0
  %979 = vmatprep.mubr.bf16.mxu0 0
  %980 = vmatmul.mubr.bf16.gmra.mrb[0].mxu0 %v712
  %v981 = vpop.f32.mrb[0].mxu0
  %v982 = vadd.f32 %v585, %v981
  %v983 = vpop.f32.mrb[0].mxu0
  %v984 = vpop.f32.mrb[0].mxu0
  %v985 = vadd.f32 %v588, %v984
  %v986 = vpop.f32.mrb[0].mxu0
  %987 = vmatprep.mubr.bf16.mxu0 0
  %988 = vmatmul.mubr.bf16.gmra.mrb[0].mxu0 %v715
  %v989 = vpop.f32.mrb[0].mxu0
  %v990 = vadd.f32 %v593, %v989
  %v991 = vpop.f32.mrb[0].mxu0
  %v992 = vpop.f32.mrb[0].mxu0
  %v993 = vadd.f32 %v596, %v992
  %v994 = vpop.f32.mrb[0].mxu0
  %995 = vmatprep.mubr.bf16.mxu0 0
  %996 = vmatmul.mubr.bf16.gmra.mrb[0].mxu0 %v718
  %v997 = vpop.f32.mrb[0].mxu0
  %v998 = vadd.f32 %v601, %v997
  %v999 = vpop.f32.mrb[0].mxu0
  %v1000 = vpop.f32.mrb[0].mxu0
  %v1001 = vadd.f32 %v604, %v1000
  %v1002 = vpop.f32.mrb[0].mxu0
  %1003 = vmatprep.mubr.bf16.mxu0 0
  %1004 = vmatmul.mubr.bf16.gmra.mrb[0].mxu0 %v721
  %v1005 = vpop.f32.mrb[0].mxu0
  %v1006 = vadd.f32 %v609, %v1005
  %v1007 = vpop.f32.mrb[0].mxu0
  %v1008 = vpop.f32.mrb[0].mxu0
  %v1009 = vadd.f32 %v612, %v1008
  %v1010 = vpop.f32.mrb[0].mxu0
  %1011 = vdwg.mxu0
  %v1012 = vld [vmem:[%s0 + $0x1] sm:$0xff]
  %v1013 = vld [vmem:[%s0 + $0x9] sm:$0xff]
  %v1014 = vld [vmem:[%s0 + $0x19] sm:$0xff]
  %v1015 = vld [vmem:[%s0 + $0x21] sm:$0xff]
  %v1016 = vld [vmem:[%s0 + $0x31] sm:$0xff]
  %v1017 = vld [vmem:[%s0 + $0x39] sm:$0xff]
  %v1018 = vld [vmem:[%s0 + $0x49] sm:$0xff]
  %v1019 = vld [vmem:[%s0 + $0x51] sm:$0xff]
  %v1020 = vld [vmem:[%s0 + $0x61] sm:$0xff]
  %v1021 = vld [vmem:[%s0 + $0x69] sm:$0xff]
  %v1022 = vld [vmem:[%s0 + $0x79] sm:$0xff]
  %v1023 = vld [vmem:[%s0 + $0x81] sm:$0xff]
  %v1024 = vld [vmem:[%s0 + $0x91] sm:$0xff]
  %v1025 = vld [vmem:[%s0 + $0x99] sm:$0xff]
  %v1026 = vld [vmem:[%s0 + $0xa9] sm:$0xff]
  %v1027 = vld [vmem:[%s0 + $0xb1] sm:$0xff]
  %v1028 = vld [vmem:[%s0 + $0xc1] sm:$0xff]
  %v1029 = vld [vmem:[%s0 + $0xc9] sm:$0xff]
  %v1030 = vld [vmem:[%s0 + $0xd9] sm:$0xff]
  %v1031 = vld [vmem:[%s0 + $0xe1] sm:$0xff]
  %v1032 = vld [vmem:[%s0 + $0xf1] sm:$0xff]
  %v1033 = vld [vmem:[%s0 + $0xf9] sm:$0xff]
  %v1034 = vld [vmem:[%s0 + $0x109] sm:$0xff]
  %v1035 = vld [vmem:[%s0 + $0x111] sm:$0xff]
  %v1036 = vld [vmem:[%s0 + $0x121] sm:$0xff]
  %v1037 = vld [vmem:[%s0 + $0x129] sm:$0xff]
  %v1038 = vld [vmem:[%s0 + $0x139] sm:$0xff]
  %v1039 = vld [vmem:[%s0 + $0x141] sm:$0xff]
  %v1040 = vld [vmem:[%s0 + $0x151] sm:$0xff]
  %v1041 = vld [vmem:[%s0 + $0x159] sm:$0xff]
  %v1042 = vld [vmem:[%s0 + $0x169] sm:$0xff]
  %v1043 = vld [vmem:[%s0 + $0x171] sm:$0xff]
  %v1044 = vld [vmem:[%s0 + $0x199] sm:$0xff]
  %v1045 = vld [vmem:[%s0 + $0x1a1] sm:$0xff]
  %v1046 = vld [vmem:[%s0 + $0x1b1] sm:$0xff]
  %v1047 = vld [vmem:[%s0 + $0x1b9] sm:$0xff]
  %v1048 = vld [vmem:[%s0 + $0x1c9] sm:$0xff]
  %v1049 = vld [vmem:[%s0 + $0x1d1] sm:$0xff]
  %v1050 = vld [vmem:[%s0 + $0x1e1] sm:$0xff]
  %v1051 = vld [vmem:[%s0 + $0x1e9] sm:$0xff]
  %v1052 = vld [vmem:[%s0 + $0x1f9] sm:$0xff]
  %v1053 = vld [vmem:[%s0 + $0x201] sm:$0xff]
  %v1054 = vld [vmem:[%s0 + $0x211] sm:$0xff]
  %v1055 = vld [vmem:[%s0 + $0x219] sm:$0xff]
  %v1056 = vld [vmem:[%s0 + $0x229] sm:$0xff]
  %v1057 = vld [vmem:[%s0 + $0x231] sm:$0xff]
  %v1058 = vld [vmem:[%s0 + $0x241] sm:$0xff]
  %v1059 = vld [vmem:[%s0 + $0x249] sm:$0xff]
  %v1060 = vld [vmem:[%s0 + $0x259] sm:$0xff]
  %v1061 = vld [vmem:[%s0 + $0x261] sm:$0xff]
  %v1062 = vld [vmem:[%s0 + $0x271] sm:$0xff]
  %v1063 = vld [vmem:[%s0 + $0x279] sm:$0xff]
  %v1064 = vld [vmem:[%s0 + $0x289] sm:$0xff]
  %v1065 = vld [vmem:[%s0 + $0x291] sm:$0xff]
  %v1066 = vld [vmem:[%s0 + $0x2a1] sm:$0xff]
  %v1067 = vld [vmem:[%s0 + $0x2a9] sm:$0xff]
  %v1068 = vld [vmem:[%s0 + $0x2b9] sm:$0xff]
  %v1069 = vld [vmem:[%s0 + $0x2c1] sm:$0xff]
  %v1070 = vld [vmem:[%s0 + $0x2d1] sm:$0xff]
  %v1071 = vld [vmem:[%s0 + $0x2d9] sm:$0xff]
  %v1072 = vld [vmem:[%s0 + $0x2e9] sm:$0xff]
  %v1073 = vld [vmem:[%s0 + $0x2f1] sm:$0xff]
  %v1074 = vld [vmem:[%s0 + $0x301] sm:$0xff]
  %v1075 = vld [vmem:[%s0 + $0x309] sm:$0xff]
  %v1076 = vpack.c.bf16 %v1013, %v1012
  %v1077 = vpack.c.bf16 %v1015, %v1014
  %v1078 = vpack.c.bf16 %v1017, %v1016
  %v1079 = vpack.c.bf16 %v1019, %v1018
  %v1080 = vpack.c.bf16 %v1021, %v1020
  %v1081 = vpack.c.bf16 %v1023, %v1022
  %v1082 = vpack.c.bf16 %v1025, %v1024
  %v1083 = vpack.c.bf16 %v1027, %v1026
  %v1084 = vpack.c.bf16 %v1029, %v1028
  %v1085 = vpack.c.bf16 %v1031, %v1030
  %v1086 = vpack.c.bf16 %v1033, %v1032
  %v1087 = vpack.c.bf16 %v1035, %v1034
  %v1088 = vpack.c.bf16 %v1037, %v1036
  %v1089 = vpack.c.bf16 %v1039, %v1038
  %v1090 = vpack.c.bf16 %v1041, %v1040
  %v1091 = vpack.c.bf16 %v1043, %v1042
  %v1092 = vpack.c.bf16 %v1045, %v1044
  %v1093 = vpack.c.bf16 %v1047, %v1046
  %v1094 = vpack.c.bf16 %v1049, %v1048
  %v1095 = vpack.c.bf16 %v1051, %v1050
  %v1096 = vpack.c.bf16 %v1053, %v1052
  %v1097 = vpack.c.bf16 %v1055, %v1054
  %v1098 = vpack.c.bf16 %v1057, %v1056
  %v1099 = vpack.c.bf16 %v1059, %v1058
  %v1100 = vpack.c.bf16 %v1061, %v1060
  %v1101 = vpack.c.bf16 %v1063, %v1062
  %v1102 = vpack.c.bf16 %v1065, %v1064
  %v1103 = vpack.c.bf16 %v1067, %v1066
  %v1104 = vpack.c.bf16 %v1069, %v1068
  %v1105 = vpack.c.bf16 %v1071, %v1070
  %v1106 = vpack.c.bf16 %v1073, %v1072
  %v1107 = vpack.c.bf16 %v1075, %v1074
  %s1108 = scalar_lea.vmem %s1, 32
  %v1109 = vld [vmem:[%s1108] sm:$0xf]
  %v1110 = vld [vmem:[%s1108 + $0x4] sm:$0xf]
  %v1111 = vld [vmem:[%s1108 + $0x8] sm:$0xf]
  %v1112 = vld [vmem:[%s1108 + $0xc] sm:$0xf]
  %v1117 = vunpack.c.l.b16 %v1109
  %v1118 = vunpack.c.l.b16 %v1110
  %v1119 = vunpack.c.l.b16 %v1111
  %v1120 = vunpack.c.l.b16 %v1112
  %v1121 = vpack.c.b16 %v1118, %v1117
  %v1122 = vpack.c.b16 %v1120, %v1119
  %v1126 = vsel %vm229, %v1076, 0
  %v1129 = vsel %vm229, %v1077, 0
  %v1132 = vsel %vm229, %v1078, 0
  %v1135 = vsel %vm229, %v1079, 0
  %v1138 = vsel %vm229, %v1080, 0
  %v1141 = vsel %vm229, %v1081, 0
  %v1144 = vsel %vm229, %v1082, 0
  %v1147 = vsel %vm229, %v1083, 0
  %v1150 = vsel %vm229, %v1084, 0
  %v1153 = vsel %vm229, %v1085, 0
  %v1156 = vsel %vm229, %v1086, 0
  %v1159 = vsel %vm229, %v1087, 0
  %v1162 = vsel %vm229, %v1088, 0
  %v1165 = vsel %vm229, %v1089, 0
  %v1168 = vsel %vm229, %v1090, 0
  %v1171 = vsel %vm229, %v1091, 0
  %v1174 = vsel %vm229, %v1092, 0
  %v1177 = vsel %vm229, %v1093, 0
  %v1180 = vsel %vm229, %v1094, 0
  %v1183 = vsel %vm229, %v1095, 0
  %v1186 = vsel %vm229, %v1096, 0
  %v1189 = vsel %vm229, %v1097, 0
  %v1192 = vsel %vm229, %v1098, 0
  %v1195 = vsel %vm229, %v1099, 0
  %v1198 = vsel %vm229, %v1100, 0
  %v1201 = vsel %vm229, %v1101, 0
  %v1204 = vsel %vm229, %v1102, 0
  %v1207 = vsel %vm229, %v1103, 0
  %v1210 = vsel %vm229, %v1104, 0
  %v1213 = vsel %vm229, %v1105, 0
  %v1216 = vsel %vm229, %v1106, 0
  %v1219 = vsel %vm229, %v1107, 0
  %1221 = vmatprep.subr.bf16.mxu0 0
  %1222 = vmatpush1.bf16.msra.mxu0 %v1121
  %1223 = vmatprep.subr.bf16.mxu0 0
  %1224 = vmatpush1.bf16.msra.mxu0 %v1122
  %1225 = vmatprep.subr.bf16.mxu0 0
  %1226 = vmatpush1.bf16.msra.mxu0 0
  %1227 = vmatprep.subr.bf16.mxu0 0
  %1228 = vmatpush1.bf16.msra.mxu0 0
  %1229 = vmatprep.subr.bf16.mxu0 0
  %1230 = vmatpush1.bf16.msra.mxu0 0
  %1231 = vmatprep.subr.bf16.mxu0 0
  %1232 = vmatpush1.bf16.msra.mxu0 0
  %1233 = vmatprep.subr.bf16.mxu0 0
  %1234 = vmatpush1.bf16.msra.mxu0 0
  %1235 = vmatprep.subr.bf16.mxu0 0
  %1236 = vmatpush1.bf16.msra.mxu0 0
  %1237 = vmatprep.subr.bf16.mxu0 0
  %1238 = vmatpush1.bf16.msra.mxu0 0
  %1239 = vmatprep.subr.bf16.mxu0 0
  %1240 = vmatpush1.bf16.msra.mxu0 0
  %1241 = vmatprep.subr.bf16.mxu0 0
  %1242 = vmatpush1.bf16.msra.mxu0 0
  %1243 = vmatprep.subr.bf16.mxu0 0
  %1244 = vmatpush1.bf16.msra.mxu0 0
  %1245 = vmatprep.subr.bf16.mxu0 0
  %1246 = vmatpush1.bf16.msra.mxu0 0
  %1247 = vmatprep.subr.bf16.mxu0 0
  %1248 = vmatpush1.bf16.msra.mxu0 0
  %1249 = vmatprep.subr.bf16.mxu0 0
  %1250 = vmatpush1.bf16.msra.mxu0 0
  %1251 = vmatprep.subr.bf16.mxu0 0
  %1252 = vmatpush1.bf16.msra.mxu0 0
  %1253 = vmatprep.mubr.bf16.mxu0 0
  %1254 = vmatmul.mubr.bf16.gmra.mrb[0].mxu0 %v1126
  %v1255 = vpop.f32.mrb[0].mxu0
  %v1256 = vadd.f32 0.0, %v1255
  %v1257 = vpop.f32.mrb[0].mxu0
  %v1258 = vpop.f32.mrb[0].mxu0
  %v1259 = vadd.f32 0.0, %v1258
  %v1260 = vpop.f32.mrb[0].mxu0
  %1261 = vmatprep.mubr.bf16.mxu0 0
  %1262 = vmatmul.mubr.bf16.gmra.mrb[0].mxu0 %v1129
  %v1263 = vpop.f32.mrb[0].mxu0
  %v1264 = vadd.f32 0.0, %v1263
  %v1265 = vpop.f32.mrb[0].mxu0
  %v1266 = vpop.f32.mrb[0].mxu0
  %v1267 = vadd.f32 0.0, %v1266
  %v1268 = vpop.f32.mrb[0].mxu0
  %1269 = vmatprep.mubr.bf16.mxu0 0
  %1270 = vmatmul.mubr.bf16.gmra.mrb[0].mxu0 %v1132
  %v1271 = vpop.f32.mrb[0].mxu0
  %v1272 = vadd.f32 0.0, %v1271
  %v1273 = vpop.f32.mrb[0].mxu0
  %v1274 = vpop.f32.mrb[0].mxu0
  %v1275 = vadd.f32 0.0, %v1274
  %v1276 = vpop.f32.mrb[0].mxu0
  %1277 = vmatprep.mubr.bf16.mxu0 0
  %1278 = vmatmul.mubr.bf16.gmra.mrb[0].mxu0 %v1135
  %v1279 = vpop.f32.mrb[0].mxu0
  %v1280 = vadd.f32 0.0, %v1279
  %v1281 = vpop.f32.mrb[0].mxu0
  %v1282 = vpop.f32.mrb[0].mxu0
  %v1283 = vadd.f32 0.0, %v1282
  %v1284 = vpop.f32.mrb[0].mxu0
  %1285 = vmatprep.mubr.bf16.mxu0 0
  %1286 = vmatmul.mubr.bf16.gmra.mrb[0].mxu0 %v1138
  %v1287 = vpop.f32.mrb[0].mxu0
  %v1288 = vadd.f32 0.0, %v1287
  %v1289 = vpop.f32.mrb[0].mxu0
  %v1290 = vpop.f32.mrb[0].mxu0
  %v1291 = vadd.f32 0.0, %v1290
  %v1292 = vpop.f32.mrb[0].mxu0
  %1293 = vmatprep.mubr.bf16.mxu0 0
  %1294 = vmatmul.mubr.bf16.gmra.mrb[0].mxu0 %v1141
  %v1295 = vpop.f32.mrb[0].mxu0
  %v1296 = vadd.f32 0.0, %v1295
  %v1297 = vpop.f32.mrb[0].mxu0
  %v1298 = vpop.f32.mrb[0].mxu0
  %v1299 = vadd.f32 0.0, %v1298
  %v1300 = vpop.f32.mrb[0].mxu0
  %1301 = vmatprep.mubr.bf16.mxu0 0
  %1302 = vmatmul.mubr.bf16.gmra.mrb[0].mxu0 %v1144
  %v1303 = vpop.f32.mrb[0].mxu0
  %v1304 = vadd.f32 0.0, %v1303
  %v1305 = vpop.f32.mrb[0].mxu0
  %v1306 = vpop.f32.mrb[0].mxu0
  %v1307 = vadd.f32 0.0, %v1306
  %v1308 = vpop.f32.mrb[0].mxu0
  %1309 = vmatprep.mubr.bf16.mxu0 0
  %1310 = vmatmul.mubr.bf16.gmra.mrb[0].mxu0 %v1147
  %v1311 = vpop.f32.mrb[0].mxu0
  %v1312 = vadd.f32 0.0, %v1311
  %v1313 = vpop.f32.mrb[0].mxu0
  %v1314 = vpop.f32.mrb[0].mxu0
  %v1315 = vadd.f32 0.0, %v1314
  %v1316 = vpop.f32.mrb[0].mxu0
  %1317 = vmatprep.mubr.bf16.mxu0 0
  %1318 = vmatmul.mubr.bf16.gmra.mrb[0].mxu0 %v1150
  %v1319 = vpop.f32.mrb[0].mxu0
  %v1320 = vadd.f32 0.0, %v1319
  %v1321 = vpop.f32.mrb[0].mxu0
  %v1322 = vpop.f32.mrb[0].mxu0
  %v1323 = vadd.f32 0.0, %v1322
  %v1324 = vpop.f32.mrb[0].mxu0
  %1325 = vmatprep.mubr.bf16.mxu0 0
  %1326 = vmatmul.mubr.bf16.gmra.mrb[0].mxu0 %v1153
  %v1327 = vpop.f32.mrb[0].mxu0
  %v1328 = vadd.f32 0.0, %v1327
  %v1329 = vpop.f32.mrb[0].mxu0
  %v1330 = vpop.f32.mrb[0].mxu0
  %v1331 = vadd.f32 0.0, %v1330
  %v1332 = vpop.f32.mrb[0].mxu0
  %1333 = vmatprep.mubr.bf16.mxu0 0
  %1334 = vmatmul.mubr.bf16.gmra.mrb[0].mxu0 %v1156
  %v1335 = vpop.f32.mrb[0].mxu0
  %v1336 = vadd.f32 0.0, %v1335
  %v1337 = vpop.f32.mrb[0].mxu0
  %v1338 = vpop.f32.mrb[0].mxu0
  %v1339 = vadd.f32 0.0, %v1338
  %v1340 = vpop.f32.mrb[0].mxu0
  %1341 = vmatprep.mubr.bf16.mxu0 0
  %1342 = vmatmul.mubr.bf16.gmra.mrb[0].mxu0 %v1159
  %v1343 = vpop.f32.mrb[0].mxu0
  %v1344 = vadd.f32 0.0, %v1343
  %v1345 = vpop.f32.mrb[0].mxu0
  %v1346 = vpop.f32.mrb[0].mxu0
  %v1347 = vadd.f32 0.0, %v1346
  %v1348 = vpop.f32.mrb[0].mxu0
  %1349 = vmatprep.mubr.bf16.mxu0 0
  %1350 = vmatmul.mubr.bf16.gmra.mrb[0].mxu0 %v1162
  %v1351 = vpop.f32.mrb[0].mxu0
  %v1352 = vadd.f32 0.0, %v1351
  %v1353 = vpop.f32.mrb[0].mxu0
  %v1354 = vpop.f32.mrb[0].mxu0
  %v1355 = vadd.f32 0.0, %v1354
  %v1356 = vpop.f32.mrb[0].mxu0
  %1357 = vmatprep.mubr.bf16.mxu0 0
  %1358 = vmatmul.mubr.bf16.gmra.mrb[0].mxu0 %v1165
  %v1359 = vpop.f32.mrb[0].mxu0
  %v1360 = vadd.f32 0.0, %v1359
  %v1361 = vpop.f32.mrb[0].mxu0
  %v1362 = vpop.f32.mrb[0].mxu0
  %v1363 = vadd.f32 0.0, %v1362
  %v1364 = vpop.f32.mrb[0].mxu0
  %1365 = vmatprep.mubr.bf16.mxu0 0
  %1366 = vmatmul.mubr.bf16.gmra.mrb[0].mxu0 %v1168
  %v1367 = vpop.f32.mrb[0].mxu0
  %v1368 = vadd.f32 0.0, %v1367
  %v1369 = vpop.f32.mrb[0].mxu0
  %v1370 = vpop.f32.mrb[0].mxu0
  %v1371 = vadd.f32 0.0, %v1370
  %v1372 = vpop.f32.mrb[0].mxu0
  %1373 = vmatprep.mubr.bf16.mxu0 0
  %1374 = vmatmul.mubr.bf16.gmra.mrb[0].mxu0 %v1171
  %v1375 = vpop.f32.mrb[0].mxu0
  %v1376 = vadd.f32 0.0, %v1375
  %v1377 = vpop.f32.mrb[0].mxu0
  %v1378 = vpop.f32.mrb[0].mxu0
  %v1379 = vadd.f32 0.0, %v1378
  %v1380 = vpop.f32.mrb[0].mxu0
  %1381 = vmatprep.mubr.bf16.mxu0 0
  %1382 = vmatmul.mubr.bf16.gmra.mrb[0].mxu0 %v1174
  %v1383 = vpop.f32.mrb[0].mxu0
  %v1384 = vadd.f32 0.0, %v1383
  %v1385 = vpop.f32.mrb[0].mxu0
  %v1386 = vpop.f32.mrb[0].mxu0
  %v1387 = vadd.f32 0.0, %v1386
  %v1388 = vpop.f32.mrb[0].mxu0
  %1389 = vmatprep.mubr.bf16.mxu0 0
  %1390 = vmatmul.mubr.bf16.gmra.mrb[0].mxu0 %v1177
  %v1391 = vpop.f32.mrb[0].mxu0
  %v1392 = vadd.f32 0.0, %v1391
  %v1393 = vpop.f32.mrb[0].mxu0
  %v1394 = vpop.f32.mrb[0].mxu0
  %v1395 = vadd.f32 0.0, %v1394
  %v1396 = vpop.f32.mrb[0].mxu0
  %1397 = vmatprep.mubr.bf16.mxu0 0
  %1398 = vmatmul.mubr.bf16.gmra.mrb[0].mxu0 %v1180
  %v1399 = vpop.f32.mrb[0].mxu0
  %v1400 = vadd.f32 0.0, %v1399
  %v1401 = vpop.f32.mrb[0].mxu0
  %v1402 = vpop.f32.mrb[0].mxu0
  %v1403 = vadd.f32 0.0, %v1402
  %v1404 = vpop.f32.mrb[0].mxu0
  %1405 = vmatprep.mubr.bf16.mxu0 0
  %1406 = vmatmul.mubr.bf16.gmra.mrb[0].mxu0 %v1183
  %v1407 = vpop.f32.mrb[0].mxu0
  %v1408 = vadd.f32 0.0, %v1407
  %v1409 = vpop.f32.mrb[0].mxu0
  %v1410 = vpop.f32.mrb[0].mxu0
  %v1411 = vadd.f32 0.0, %v1410
  %v1412 = vpop.f32.mrb[0].mxu0
  %1413 = vmatprep.mubr.bf16.mxu0 0
  %1414 = vmatmul.mubr.bf16.gmra.mrb[0].mxu0 %v1186
  %v1415 = vpop.f32.mrb[0].mxu0
  %v1416 = vadd.f32 0.0, %v1415
  %v1417 = vpop.f32.mrb[0].mxu0
  %v1418 = vpop.f32.mrb[0].mxu0
  %v1419 = vadd.f32 0.0, %v1418
  %v1420 = vpop.f32.mrb[0].mxu0
  %1421 = vmatprep.mubr.bf16.mxu0 0
  %1422 = vmatmul.mubr.bf16.gmra.mrb[0].mxu0 %v1189
  %v1423 = vpop.f32.mrb[0].mxu0
  %v1424 = vadd.f32 0.0, %v1423
  %v1425 = vpop.f32.mrb[0].mxu0
  %v1426 = vpop.f32.mrb[0].mxu0
  %v1427 = vadd.f32 0.0, %v1426
  %v1428 = vpop.f32.mrb[0].mxu0
  %1429 = vmatprep.mubr.bf16.mxu0 0
  %1430 = vmatmul.mubr.bf16.gmra.mrb[0].mxu0 %v1192
  %v1431 = vpop.f32.mrb[0].mxu0
  %v1432 = vadd.f32 0.0, %v1431
  %v1433 = vpop.f32.mrb[0].mxu0
  %v1434 = vpop.f32.mrb[0].mxu0
  %v1435 = vadd.f32 0.0, %v1434
  %v1436 = vpop.f32.mrb[0].mxu0
  %1437 = vmatprep.mubr.bf16.mxu0 0
  %1438 = vmatmul.mubr.bf16.gmra.mrb[0].mxu0 %v1195
  %v1439 = vpop.f32.mrb[0].mxu0
  %v1440 = vadd.f32 0.0, %v1439
  %v1441 = vpop.f32.mrb[0].mxu0
  %v1442 = vpop.f32.mrb[0].mxu0
  %v1443 = vadd.f32 0.0, %v1442
  %v1444 = vpop.f32.mrb[0].mxu0
  %1445 = vmatprep.mubr.bf16.mxu0 0
  %1446 = vmatmul.mubr.bf16.gmra.mrb[0].mxu0 %v1198
  %v1447 = vpop.f32.mrb[0].mxu0
  %v1448 = vadd.f32 0.0, %v1447
  %v1449 = vpop.f32.mrb[0].mxu0
  %v1450 = vpop.f32.mrb[0].mxu0
  %v1451 = vadd.f32 0.0, %v1450
  %v1452 = vpop.f32.mrb[0].mxu0
  %1453 = vmatprep.mubr.bf16.mxu0 0
  %1454 = vmatmul.mubr.bf16.gmra.mrb[0].mxu0 %v1201
  %v1455 = vpop.f32.mrb[0].mxu0
  %v1456 = vadd.f32 0.0, %v1455
  %v1457 = vpop.f32.mrb[0].mxu0
  %v1458 = vpop.f32.mrb[0].mxu0
  %v1459 = vadd.f32 0.0, %v1458
  %v1460 = vpop.f32.mrb[0].mxu0
  %1461 = vmatprep.mubr.bf16.mxu0 0
  %1462 = vmatmul.mubr.bf16.gmra.mrb[0].mxu0 %v1204
  %v1463 = vpop.f32.mrb[0].mxu0
  %v1464 = vadd.f32 0.0, %v1463
  %v1465 = vpop.f32.mrb[0].mxu0
  %v1466 = vpop.f32.mrb[0].mxu0
  %v1467 = vadd.f32 0.0, %v1466
  %v1468 = vpop.f32.mrb[0].mxu0
  %1469 = vmatprep.mubr.bf16.mxu0 0
  %1470 = vmatmul.mubr.bf16.gmra.mrb[0].mxu0 %v1207
  %v1471 = vpop.f32.mrb[0].mxu0
  %v1472 = vadd.f32 0.0, %v1471
  %v1473 = vpop.f32.mrb[0].mxu0
  %v1474 = vpop.f32.mrb[0].mxu0
  %v1475 = vadd.f32 0.0, %v1474
  %v1476 = vpop.f32.mrb[0].mxu0
  %1477 = vmatprep.mubr.bf16.mxu0 0
  %1478 = vmatmul.mubr.bf16.gmra.mrb[0].mxu0 %v1210
  %v1479 = vpop.f32.mrb[0].mxu0
  %v1480 = vadd.f32 0.0, %v1479
  %v1481 = vpop.f32.mrb[0].mxu0
  %v1482 = vpop.f32.mrb[0].mxu0
  %v1483 = vadd.f32 0.0, %v1482
  %v1484 = vpop.f32.mrb[0].mxu0
  %1485 = vmatprep.mubr.bf16.mxu0 0
  %1486 = vmatmul.mubr.bf16.gmra.mrb[0].mxu0 %v1213
  %v1487 = vpop.f32.mrb[0].mxu0
  %v1488 = vadd.f32 0.0, %v1487
  %v1489 = vpop.f32.mrb[0].mxu0
  %v1490 = vpop.f32.mrb[0].mxu0
  %v1491 = vadd.f32 0.0, %v1490
  %v1492 = vpop.f32.mrb[0].mxu0
  %1493 = vmatprep.mubr.bf16.mxu0 0
  %1494 = vmatmul.mubr.bf16.gmra.mrb[0].mxu0 %v1216
  %v1495 = vpop.f32.mrb[0].mxu0
  %v1496 = vadd.f32 0.0, %v1495
  %v1497 = vpop.f32.mrb[0].mxu0
  %v1498 = vpop.f32.mrb[0].mxu0
  %v1499 = vadd.f32 0.0, %v1498
  %v1500 = vpop.f32.mrb[0].mxu0
  %1501 = vmatprep.mubr.bf16.mxu0 0
  %1502 = vmatmul.mubr.bf16.gmra.mrb[0].mxu0 %v1219
  %v1503 = vpop.f32.mrb[0].mxu0
  %v1504 = vadd.f32 0.0, %v1503
  %v1505 = vpop.f32.mrb[0].mxu0
  %v1506 = vpop.f32.mrb[0].mxu0
  %v1507 = vadd.f32 0.0, %v1506
  %v1508 = vpop.f32.mrb[0].mxu0
  %1509 = vdwg.mxu0
  %v1510 = vadd.f32 %v758, %v1256
  %v1511 = vadd.f32 %v761, %v1259
  %v1512 = vadd.f32 %v766, %v1264
  %v1513 = vadd.f32 %v769, %v1267
  %v1514 = vadd.f32 %v774, %v1272
  %v1515 = vadd.f32 %v777, %v1275
  %v1516 = vadd.f32 %v782, %v1280
  %v1517 = vadd.f32 %v785, %v1283
  %v1518 = vadd.f32 %v790, %v1288
  %v1519 = vadd.f32 %v793, %v1291
  %v1520 = vadd.f32 %v798, %v1296
  %v1521 = vadd.f32 %v801, %v1299
  %v1522 = vadd.f32 %v806, %v1304
  %v1523 = vadd.f32 %v809, %v1307
  %v1524 = vadd.f32 %v814, %v1312
  %v1525 = vadd.f32 %v817, %v1315
  %v1526 = vadd.f32 %v822, %v1320
  %v1527 = vadd.f32 %v825, %v1323
  %v1528 = vadd.f32 %v830, %v1328
  %v1529 = vadd.f32 %v833, %v1331
  %v1530 = vadd.f32 %v838, %v1336
  %v1531 = vadd.f32 %v841, %v1339
  %v1532 = vadd.f32 %v846, %v1344
  %v1533 = vadd.f32 %v849, %v1347
  %v1534 = vadd.f32 %v854, %v1352
  %v1535 = vadd.f32 %v857, %v1355
  %v1536 = vadd.f32 %v862, %v1360
  %v1537 = vadd.f32 %v865, %v1363
  %v1538 = vadd.f32 %v870, %v1368
  %v1539 = vadd.f32 %v873, %v1371
  %v1540 = vadd.f32 %v878, %v1376
  %v1541 = vadd.f32 %v881, %v1379
  %v1542 = vadd.f32 %v886, %v1384
  %v1543 = vadd.f32 %v889, %v1387
  %v1544 = vadd.f32 %v894, %v1392
  %v1545 = vadd.f32 %v897, %v1395
  %v1546 = vadd.f32 %v902, %v1400
  %v1547 = vadd.f32 %v905, %v1403
  %v1548 = vadd.f32 %v910, %v1408
  %v1549 = vadd.f32 %v913, %v1411
  %v1550 = vadd.f32 %v918, %v1416
  %v1551 = vadd.f32 %v921, %v1419
  %v1552 = vadd.f32 %v926, %v1424
  %v1553 = vadd.f32 %v929, %v1427
  %v1554 = vadd.f32 %v934, %v1432
  %v1555 = vadd.f32 %v937, %v1435
  %v1556 = vadd.f32 %v942, %v1440
  %v1557 = vadd.f32 %v945, %v1443
  %v1558 = vadd.f32 %v950, %v1448
  %v1559 = vadd.f32 %v953, %v1451
  %v1560 = vadd.f32 %v958, %v1456
  %v1561 = vadd.f32 %v961, %v1459
  %v1562 = vadd.f32 %v966, %v1464
  %v1563 = vadd.f32 %v969, %v1467
  %v1564 = vadd.f32 %v974, %v1472
  %v1565 = vadd.f32 %v977, %v1475
  %v1566 = vadd.f32 %v982, %v1480
  %v1567 = vadd.f32 %v985, %v1483
  %v1568 = vadd.f32 %v990, %v1488
  %v1569 = vadd.f32 %v993, %v1491
  %v1570 = vadd.f32 %v998, %v1496
  %v1571 = vadd.f32 %v1001, %v1499
  %v1572 = vadd.f32 %v1006, %v1504
  %v1573 = vadd.f32 %v1009, %v1507
  %s1574 = scalar_lea.vmem %s0, 1632
  %v1575 = vld [vmem:[%s1574] sm:$0xff]
  %v1576 = vld [vmem:[%s1574 + $0x8] sm:$0xff]
  %v1577 = vld [vmem:[%s1574 + $0x18] sm:$0xff]
  %v1578 = vld [vmem:[%s1574 + $0x20] sm:$0xff]
  %v1579 = vld [vmem:[%s1574 + $0x30] sm:$0xff]
  %v1580 = vld [vmem:[%s1574 + $0x38] sm:$0xff]
  %v1581 = vld [vmem:[%s1574 + $0x48] sm:$0xff]
  %v1582 = vld [vmem:[%s1574 + $0x50] sm:$0xff]
  %v1583 = vld [vmem:[%s1574 + $0x60] sm:$0xff]
  %v1584 = vld [vmem:[%s1574 + $0x68] sm:$0xff]
  %v1585 = vld [vmem:[%s1574 + $0x78] sm:$0xff]
  %v1586 = vld [vmem:[%s1574 + $0x80] sm:$0xff]
  %v1587 = vld [vmem:[%s1574 + $0x90] sm:$0xff]
  %v1588 = vld [vmem:[%s1574 + $0x98] sm:$0xff]
  %v1589 = vld [vmem:[%s1574 + $0xa8] sm:$0xff]
  %v1590 = vld [vmem:[%s1574 + $0xb0] sm:$0xff]
  %v1591 = vld [vmem:[%s1574 + $0xc0] sm:$0xff]
  %v1592 = vld [vmem:[%s1574 + $0xc8] sm:$0xff]
  %v1593 = vld [vmem:[%s1574 + $0xd8] sm:$0xff]
  %v1594 = vld [vmem:[%s1574 + $0xe0] sm:$0xff]
  %v1595 = vld [vmem:[%s1574 + $0xf0] sm:$0xff]
  %v1596 = vld [vmem:[%s1574 + $0xf8] sm:$0xff]
  %v1597 = vld [vmem:[%s1574 + $0x108] sm:$0xff]
  %v1598 = vld [vmem:[%s1574 + $0x110] sm:$0xff]
  %v1599 = vld [vmem:[%s1574 + $0x120] sm:$0xff]
  %v1600 = vld [vmem:[%s1574 + $0x128] sm:$0xff]
  %v1601 = vld [vmem:[%s1574 + $0x138] sm:$0xff]
  %v1602 = vld [vmem:[%s1574 + $0x140] sm:$0xff]
  %v1603 = vld [vmem:[%s1574 + $0x150] sm:$0xff]
  %v1604 = vld [vmem:[%s1574 + $0x158] sm:$0xff]
  %v1605 = vld [vmem:[%s1574 + $0x168] sm:$0xff]
  %v1606 = vld [vmem:[%s1574 + $0x170] sm:$0xff]
  %v1607 = vld [vmem:[%s1574 + $0x198] sm:$0xff]
  %v1608 = vld [vmem:[%s1574 + $0x1a0] sm:$0xff]
  %v1609 = vld [vmem:[%s1574 + $0x1b0] sm:$0xff]
  %v1610 = vld [vmem:[%s1574 + $0x1b8] sm:$0xff]
  %v1611 = vld [vmem:[%s1574 + $0x1c8] sm:$0xff]
  %v1612 = vld [vmem:[%s1574 + $0x1d0] sm:$0xff]
  %v1613 = vld [vmem:[%s1574 + $0x1e0] sm:$0xff]
  %v1614 = vld [vmem:[%s1574 + $0x1e8] sm:$0xff]
  %v1615 = vld [vmem:[%s1574 + $0x1f8] sm:$0xff]
  %v1616 = vld [vmem:[%s1574 + $0x200] sm:$0xff]
  %v1617 = vld [vmem:[%s1574 + $0x210] sm:$0xff]
  %v1618 = vld [vmem:[%s1574 + $0x218] sm:$0xff]
  %v1619 = vld [vmem:[%s1574 + $0x228] sm:$0xff]
  %v1620 = vld [vmem:[%s1574 + $0x230] sm:$0xff]
  %v1621 = vld [vmem:[%s1574 + $0x240] sm:$0xff]
  %v1622 = vld [vmem:[%s1574 + $0x248] sm:$0xff]
  %v1623 = vld [vmem:[%s1574 + $0x258] sm:$0xff]
  %v1624 = vld [vmem:[%s1574 + $0x260] sm:$0xff]
  %v1625 = vld [vmem:[%s1574 + $0x270] sm:$0xff]
  %v1626 = vld [vmem:[%s1574 + $0x278] sm:$0xff]
  %v1627 = vld [vmem:[%s1574 + $0x288] sm:$0xff]
  %v1628 = vld [vmem:[%s1574 + $0x290] sm:$0xff]
  %v1629 = vld [vmem:[%s1574 + $0x2a0] sm:$0xff]
  %v1630 = vld [vmem:[%s1574 + $0x2a8] sm:$0xff]
  %v1631 = vld [vmem:[%s1574 + $0x2b8] sm:$0xff]
  %v1632 = vld [vmem:[%s1574 + $0x2c0] sm:$0xff]
  %v1633 = vld [vmem:[%s1574 + $0x2d0] sm:$0xff]
  %v1634 = vld [vmem:[%s1574 + $0x2d8] sm:$0xff]
  %v1635 = vld [vmem:[%s1574 + $0x2e8] sm:$0xff]
  %v1636 = vld [vmem:[%s1574 + $0x2f0] sm:$0xff]
  %v1637 = vld [vmem:[%s1574 + $0x300] sm:$0xff]
  %v1638 = vld [vmem:[%s1574 + $0x308] sm:$0xff]
  %v1639 = vpack.c.bf16 %v1576, %v1575
  %v1640 = vpack.c.bf16 %v1578, %v1577
  %v1641 = vpack.c.bf16 %v1580, %v1579
  %v1642 = vpack.c.bf16 %v1582, %v1581
  %v1643 = vpack.c.bf16 %v1584, %v1583
  %v1644 = vpack.c.bf16 %v1586, %v1585
  %v1645 = vpack.c.bf16 %v1588, %v1587
  %v1646 = vpack.c.bf16 %v1590, %v1589
  %v1647 = vpack.c.bf16 %v1592, %v1591
  %v1648 = vpack.c.bf16 %v1594, %v1593
  %v1649 = vpack.c.bf16 %v1596, %v1595
  %v1650 = vpack.c.bf16 %v1598, %v1597
  %v1651 = vpack.c.bf16 %v1600, %v1599
  %v1652 = vpack.c.bf16 %v1602, %v1601
  %v1653 = vpack.c.bf16 %v1604, %v1603
  %v1654 = vpack.c.bf16 %v1606, %v1605
  %v1655 = vpack.c.bf16 %v1608, %v1607
  %v1656 = vpack.c.bf16 %v1610, %v1609
  %v1657 = vpack.c.bf16 %v1612, %v1611
  %v1658 = vpack.c.bf16 %v1614, %v1613
  %v1659 = vpack.c.bf16 %v1616, %v1615
  %v1660 = vpack.c.bf16 %v1618, %v1617
  %v1661 = vpack.c.bf16 %v1620, %v1619
  %v1662 = vpack.c.bf16 %v1622, %v1621
  %v1663 = vpack.c.bf16 %v1624, %v1623
  %v1664 = vpack.c.bf16 %v1626, %v1625
  %v1665 = vpack.c.bf16 %v1628, %v1627
  %v1666 = vpack.c.bf16 %v1630, %v1629
  %v1667 = vpack.c.bf16 %v1632, %v1631
  %v1668 = vpack.c.bf16 %v1634, %v1633
  %v1669 = vpack.c.bf16 %v1636, %v1635
  %v1670 = vpack.c.bf16 %v1638, %v1637
  %s1671 = scalar_lea.vmem %s1, 48
  %v1672 = vld [vmem:[%s1671] sm:$0xf]
  %v1673 = vld [vmem:[%s1671 + $0x4] sm:$0xf]
  %v1674 = vld [vmem:[%s1671 + $0x8] sm:$0xf]
  %v1675 = vld [vmem:[%s1671 + $0xc] sm:$0xf]
  %v1680 = vunpack.c.l.b16 %v1672
  %v1681 = vunpack.c.l.b16 %v1673
  %v1682 = vunpack.c.l.b16 %v1674
  %v1683 = vunpack.c.l.b16 %v1675
  %v1684 = vpack.c.b16 %v1681, %v1680
  %v1685 = vpack.c.b16 %v1683, %v1682
  %v1689 = vsel %vm229, %v1639, 0
  %v1692 = vsel %vm229, %v1640, 0
  %v1695 = vsel %vm229, %v1641, 0
  %v1698 = vsel %vm229, %v1642, 0
  %v1701 = vsel %vm229, %v1643, 0
  %v1704 = vsel %vm229, %v1644, 0
  %v1707 = vsel %vm229, %v1645, 0
  %v1710 = vsel %vm229, %v1646, 0
  %v1713 = vsel %vm229, %v1647, 0
  %v1716 = vsel %vm229, %v1648, 0
  %v1719 = vsel %vm229, %v1649, 0
  %v1722 = vsel %vm229, %v1650, 0
  %v1725 = vsel %vm229, %v1651, 0
  %v1728 = vsel %vm229, %v1652, 0
  %v1731 = vsel %vm229, %v1653, 0
  %v1734 = vsel %vm229, %v1654, 0
  %v1737 = vsel %vm229, %v1655, 0
  %v1740 = vsel %vm229, %v1656, 0
  %v1743 = vsel %vm229, %v1657, 0
  %v1746 = vsel %vm229, %v1658, 0
  %v1749 = vsel %vm229, %v1659, 0
  %v1752 = vsel %vm229, %v1660, 0
  %v1755 = vsel %vm229, %v1661, 0
  %v1758 = vsel %vm229, %v1662, 0
  %v1761 = vsel %vm229, %v1663, 0
  %v1764 = vsel %vm229, %v1664, 0
  %v1767 = vsel %vm229, %v1665, 0
  %v1770 = vsel %vm229, %v1666, 0
  %v1773 = vsel %vm229, %v1667, 0
  %v1776 = vsel %vm229, %v1668, 0
  %v1779 = vsel %vm229, %v1669, 0
  %v1782 = vsel %vm229, %v1670, 0
  %1784 = vmatprep.subr.bf16.mxu0 0
  %1785 = vmatpush1.bf16.msra.mxu0 %v1684
  %1786 = vmatprep.subr.bf16.mxu0 0
  %1787 = vmatpush1.bf16.msra.mxu0 %v1685
  %1788 = vmatprep.subr.bf16.mxu0 0
  %1789 = vmatpush1.bf16.msra.mxu0 0
  %1790 = vmatprep.subr.bf16.mxu0 0
  %1791 = vmatpush1.bf16.msra.mxu0 0
  %1792 = vmatprep.subr.bf16.mxu0 0
  %1793 = vmatpush1.bf16.msra.mxu0 0
  %1794 = vmatprep.subr.bf16.mxu0 0
  %1795 = vmatpush1.bf16.msra.mxu0 0
  %1796 = vmatprep.subr.bf16.mxu0 0
  %1797 = vmatpush1.bf16.msra.mxu0 0
  %1798 = vmatprep.subr.bf16.mxu0 0
  %1799 = vmatpush1.bf16.msra.mxu0 0
  %1800 = vmatprep.subr.bf16.mxu0 0
  %1801 = vmatpush1.bf16.msra.mxu0 0
  %1802 = vmatprep.subr.bf16.mxu0 0
  %1803 = vmatpush1.bf16.msra.mxu0 0
  %1804 = vmatprep.subr.bf16.mxu0 0
  %1805 = vmatpush1.bf16.msra.mxu0 0
  %1806 = vmatprep.subr.bf16.mxu0 0
  %1807 = vmatpush1.bf16.msra.mxu0 0
  %1808 = vmatprep.subr.bf16.mxu0 0
  %1809 = vmatpush1.bf16.msra.mxu0 0
  %1810 = vmatprep.subr.bf16.mxu0 0
  %1811 = vmatpush1.bf16.msra.mxu0 0
  %1812 = vmatprep.subr.bf16.mxu0 0
  %1813 = vmatpush1.bf16.msra.mxu0 0
  %1814 = vmatprep.subr.bf16.mxu0 0
  %1815 = vmatpush1.bf16.msra.mxu0 0
  %1816 = vmatprep.mubr.bf16.mxu0 0
  %1817 = vmatmul.mubr.bf16.gmra.mrb[0].mxu0 %v1689
  %v1818 = vpop.f32.mrb[0].mxu0
  %v1819 = vadd.f32 0.0, %v1818
  %v1820 = vpop.f32.mrb[0].mxu0
  %v1821 = vpop.f32.mrb[0].mxu0
  %v1822 = vadd.f32 0.0, %v1821
  %v1823 = vpop.f32.mrb[0].mxu0
  %1824 = vmatprep.mubr.bf16.mxu0 0
  %1825 = vmatmul.mubr.bf16.gmra.mrb[0].mxu0 %v1692
  %v1826 = vpop.f32.mrb[0].mxu0
  %v1827 = vadd.f32 0.0, %v1826
  %v1828 = vpop.f32.mrb[0].mxu0
  %v1829 = vpop.f32.mrb[0].mxu0
  %v1830 = vadd.f32 0.0, %v1829
  %v1831 = vpop.f32.mrb[0].mxu0
  %1832 = vmatprep.mubr.bf16.mxu0 0
  %1833 = vmatmul.mubr.bf16.gmra.mrb[0].mxu0 %v1695
  %v1834 = vpop.f32.mrb[0].mxu0
  %v1835 = vadd.f32 0.0, %v1834
  %v1836 = vpop.f32.mrb[0].mxu0
  %v1837 = vpop.f32.mrb[0].mxu0
  %v1838 = vadd.f32 0.0, %v1837
  %v1839 = vpop.f32.mrb[0].mxu0
  %1840 = vmatprep.mubr.bf16.mxu0 0
  %1841 = vmatmul.mubr.bf16.gmra.mrb[0].mxu0 %v1698
  %v1842 = vpop.f32.mrb[0].mxu0
  %v1843 = vadd.f32 0.0, %v1842
  %v1844 = vpop.f32.mrb[0].mxu0
  %v1845 = vpop.f32.mrb[0].mxu0
  %v1846 = vadd.f32 0.0, %v1845
  %v1847 = vpop.f32.mrb[0].mxu0
  %1848 = vmatprep.mubr.bf16.mxu0 0
  %1849 = vmatmul.mubr.bf16.gmra.mrb[0].mxu0 %v1701
  %v1850 = vpop.f32.mrb[0].mxu0
  %v1851 = vadd.f32 0.0, %v1850
  %v1852 = vpop.f32.mrb[0].mxu0
  %v1853 = vpop.f32.mrb[0].mxu0
  %v1854 = vadd.f32 0.0, %v1853
  %v1855 = vpop.f32.mrb[0].mxu0
  %1856 = vmatprep.mubr.bf16.mxu0 0
  %1857 = vmatmul.mubr.bf16.gmra.mrb[0].mxu0 %v1704
  %v1858 = vpop.f32.mrb[0].mxu0
  %v1859 = vadd.f32 0.0, %v1858
  %v1860 = vpop.f32.mrb[0].mxu0
  %v1861 = vpop.f32.mrb[0].mxu0
  %v1862 = vadd.f32 0.0, %v1861
  %v1863 = vpop.f32.mrb[0].mxu0
  %1864 = vmatprep.mubr.bf16.mxu0 0
  %1865 = vmatmul.mubr.bf16.gmra.mrb[0].mxu0 %v1707
  %v1866 = vpop.f32.mrb[0].mxu0
  %v1867 = vadd.f32 0.0, %v1866
  %v1868 = vpop.f32.mrb[0].mxu0
  %v1869 = vpop.f32.mrb[0].mxu0
  %v1870 = vadd.f32 0.0, %v1869
  %v1871 = vpop.f32.mrb[0].mxu0
  %1872 = vmatprep.mubr.bf16.mxu0 0
  %1873 = vmatmul.mubr.bf16.gmra.mrb[0].mxu0 %v1710
  %v1874 = vpop.f32.mrb[0].mxu0
  %v1875 = vadd.f32 0.0, %v1874
  %v1876 = vpop.f32.mrb[0].mxu0
  %v1877 = vpop.f32.mrb[0].mxu0
  %v1878 = vadd.f32 0.0, %v1877
  %v1879 = vpop.f32.mrb[0].mxu0
  %1880 = vmatprep.mubr.bf16.mxu0 0
  %1881 = vmatmul.mubr.bf16.gmra.mrb[0].mxu0 %v1713
  %v1882 = vpop.f32.mrb[0].mxu0
  %v1883 = vadd.f32 0.0, %v1882
  %v1884 = vpop.f32.mrb[0].mxu0
  %v1885 = vpop.f32.mrb[0].mxu0
  %v1886 = vadd.f32 0.0, %v1885
  %v1887 = vpop.f32.mrb[0].mxu0
  %1888 = vmatprep.mubr.bf16.mxu0 0
  %1889 = vmatmul.mubr.bf16.gmra.mrb[0].mxu0 %v1716
  %v1890 = vpop.f32.mrb[0].mxu0
  %v1891 = vadd.f32 0.0, %v1890
  %v1892 = vpop.f32.mrb[0].mxu0
  %v1893 = vpop.f32.mrb[0].mxu0
  %v1894 = vadd.f32 0.0, %v1893
  %v1895 = vpop.f32.mrb[0].mxu0
  %1896 = vmatprep.mubr.bf16.mxu0 0
  %1897 = vmatmul.mubr.bf16.gmra.mrb[0].mxu0 %v1719
  %v1898 = vpop.f32.mrb[0].mxu0
  %v1899 = vadd.f32 0.0, %v1898
  %v1900 = vpop.f32.mrb[0].mxu0
  %v1901 = vpop.f32.mrb[0].mxu0
  %v1902 = vadd.f32 0.0, %v1901
  %v1903 = vpop.f32.mrb[0].mxu0
  %1904 = vmatprep.mubr.bf16.mxu0 0
  %1905 = vmatmul.mubr.bf16.gmra.mrb[0].mxu0 %v1722
  %v1906 = vpop.f32.mrb[0].mxu0
  %v1907 = vadd.f32 0.0, %v1906
  %v1908 = vpop.f32.mrb[0].mxu0
  %v1909 = vpop.f32.mrb[0].mxu0
  %v1910 = vadd.f32 0.0, %v1909
  %v1911 = vpop.f32.mrb[0].mxu0
  %1912 = vmatprep.mubr.bf16.mxu0 0
  %1913 = vmatmul.mubr.bf16.gmra.mrb[0].mxu0 %v1725
  %v1914 = vpop.f32.mrb[0].mxu0
  %v1915 = vadd.f32 0.0, %v1914
  %v1916 = vpop.f32.mrb[0].mxu0
  %v1917 = vpop.f32.mrb[0].mxu0
  %v1918 = vadd.f32 0.0, %v1917
  %v1919 = vpop.f32.mrb[0].mxu0
  %1920 = vmatprep.mubr.bf16.mxu0 0
  %1921 = vmatmul.mubr.bf16.gmra.mrb[0].mxu0 %v1728
  %v1922 = vpop.f32.mrb[0].mxu0
  %v1923 = vadd.f32 0.0, %v1922
  %v1924 = vpop.f32.mrb[0].mxu0
  %v1925 = vpop.f32.mrb[0].mxu0
  %v1926 = vadd.f32 0.0, %v1925
  %v1927 = vpop.f32.mrb[0].mxu0
  %1928 = vmatprep.mubr.bf16.mxu0 0
  %1929 = vmatmul.mubr.bf16.gmra.mrb[0].mxu0 %v1731
  %v1930 = vpop.f32.mrb[0].mxu0
  %v1931 = vadd.f32 0.0, %v1930
  %v1932 = vpop.f32.mrb[0].mxu0
  %v1933 = vpop.f32.mrb[0].mxu0
  %v1934 = vadd.f32 0.0, %v1933
  %v1935 = vpop.f32.mrb[0].mxu0
  %1936 = vmatprep.mubr.bf16.mxu0 0
  %1937 = vmatmul.mubr.bf16.gmra.mrb[0].mxu0 %v1734
  %v1938 = vpop.f32.mrb[0].mxu0
  %v1939 = vadd.f32 0.0, %v1938
  %v1940 = vpop.f32.mrb[0].mxu0
  %v1941 = vpop.f32.mrb[0].mxu0
  %v1942 = vadd.f32 0.0, %v1941
  %v1943 = vpop.f32.mrb[0].mxu0
  %1944 = vmatprep.mubr.bf16.mxu0 0
  %1945 = vmatmul.mubr.bf16.gmra.mrb[0].mxu0 %v1737
  %v1946 = vpop.f32.mrb[0].mxu0
  %v1947 = vadd.f32 0.0, %v1946
  %v1948 = vpop.f32.mrb[0].mxu0
  %v1949 = vpop.f32.mrb[0].mxu0
  %v1950 = vadd.f32 0.0, %v1949
  %v1951 = vpop.f32.mrb[0].mxu0
  %1952 = vmatprep.mubr.bf16.mxu0 0
  %1953 = vmatmul.mubr.bf16.gmra.mrb[0].mxu0 %v1740
  %v1954 = vpop.f32.mrb[0].mxu0
  %v1955 = vadd.f32 0.0, %v1954
  %v1956 = vpop.f32.mrb[0].mxu0
  %v1957 = vpop.f32.mrb[0].mxu0
  %v1958 = vadd.f32 0.0, %v1957
  %v1959 = vpop.f32.mrb[0].mxu0
  %1960 = vmatprep.mubr.bf16.mxu0 0
  %1961 = vmatmul.mubr.bf16.gmra.mrb[0].mxu0 %v1743
  %v1962 = vpop.f32.mrb[0].mxu0
  %v1963 = vadd.f32 0.0, %v1962
  %v1964 = vpop.f32.mrb[0].mxu0
  %v1965 = vpop.f32.mrb[0].mxu0
  %v1966 = vadd.f32 0.0, %v1965
  %v1967 = vpop.f32.mrb[0].mxu0
  %1968 = vmatprep.mubr.bf16.mxu0 0
  %1969 = vmatmul.mubr.bf16.gmra.mrb[0].mxu0 %v1746
  %v1970 = vpop.f32.mrb[0].mxu0
  %v1971 = vadd.f32 0.0, %v1970
  %v1972 = vpop.f32.mrb[0].mxu0
  %v1973 = vpop.f32.mrb[0].mxu0
  %v1974 = vadd.f32 0.0, %v1973
  %v1975 = vpop.f32.mrb[0].mxu0
  %1976 = vmatprep.mubr.bf16.mxu0 0
  %1977 = vmatmul.mubr.bf16.gmra.mrb[0].mxu0 %v1749
  %v1978 = vpop.f32.mrb[0].mxu0
  %v1979 = vadd.f32 0.0, %v1978
  %v1980 = vpop.f32.mrb[0].mxu0
  %v1981 = vpop.f32.mrb[0].mxu0
  %v1982 = vadd.f32 0.0, %v1981
  %v1983 = vpop.f32.mrb[0].mxu0
  %1984 = vmatprep.mubr.bf16.mxu0 0
  %1985 = vmatmul.mubr.bf16.gmra.mrb[0].mxu0 %v1752
  %v1986 = vpop.f32.mrb[0].mxu0
  %v1987 = vadd.f32 0.0, %v1986
  %v1988 = vpop.f32.mrb[0].mxu0
  %v1989 = vpop.f32.mrb[0].mxu0
  %v1990 = vadd.f32 0.0, %v1989
  %v1991 = vpop.f32.mrb[0].mxu0
  %1992 = vmatprep.mubr.bf16.mxu0 0
  %1993 = vmatmul.mubr.bf16.gmra.mrb[0].mxu0 %v1755
  %v1994 = vpop.f32.mrb[0].mxu0
  %v1995 = vadd.f32 0.0, %v1994
  %v1996 = vpop.f32.mrb[0].mxu0
  %v1997 = vpop.f32.mrb[0].mxu0
  %v1998 = vadd.f32 0.0, %v1997
  %v1999 = vpop.f32.mrb[0].mxu0
  %2000 = vmatprep.mubr.bf16.mxu0 0
  %2001 = vmatmul.mubr.bf16.gmra.mrb[0].mxu0 %v1758
  %v2002 = vpop.f32.mrb[0].mxu0
  %v2003 = vadd.f32 0.0, %v2002
  %v2004 = vpop.f32.mrb[0].mxu0
  %v2005 = vpop.f32.mrb[0].mxu0
  %v2006 = vadd.f32 0.0, %v2005
  %v2007 = vpop.f32.mrb[0].mxu0
  %2008 = vmatprep.mubr.bf16.mxu0 0
  %2009 = vmatmul.mubr.bf16.gmra.mrb[0].mxu0 %v1761
  %v2010 = vpop.f32.mrb[0].mxu0
  %v2011 = vadd.f32 0.0, %v2010
  %v2012 = vpop.f32.mrb[0].mxu0
  %v2013 = vpop.f32.mrb[0].mxu0
  %v2014 = vadd.f32 0.0, %v2013
  %v2015 = vpop.f32.mrb[0].mxu0
  %2016 = vmatprep.mubr.bf16.mxu0 0
  %2017 = vmatmul.mubr.bf16.gmra.mrb[0].mxu0 %v1764
  %v2018 = vpop.f32.mrb[0].mxu0
  %v2019 = vadd.f32 0.0, %v2018
  %v2020 = vpop.f32.mrb[0].mxu0
  %v2021 = vpop.f32.mrb[0].mxu0
  %v2022 = vadd.f32 0.0, %v2021
  %v2023 = vpop.f32.mrb[0].mxu0
  %2024 = vmatprep.mubr.bf16.mxu0 0
  %2025 = vmatmul.mubr.bf16.gmra.mrb[0].mxu0 %v1767
  %v2026 = vpop.f32.mrb[0].mxu0
  %v2027 = vadd.f32 0.0, %v2026
  %v2028 = vpop.f32.mrb[0].mxu0
  %v2029 = vpop.f32.mrb[0].mxu0
  %v2030 = vadd.f32 0.0, %v2029
  %v2031 = vpop.f32.mrb[0].mxu0
  %2032 = vmatprep.mubr.bf16.mxu0 0
  %2033 = vmatmul.mubr.bf16.gmra.mrb[0].mxu0 %v1770
  %v2034 = vpop.f32.mrb[0].mxu0
  %v2035 = vadd.f32 0.0, %v2034
  %v2036 = vpop.f32.mrb[0].mxu0
  %v2037 = vpop.f32.mrb[0].mxu0
  %v2038 = vadd.f32 0.0, %v2037
  %v2039 = vpop.f32.mrb[0].mxu0
  %2040 = vmatprep.mubr.bf16.mxu0 0
  %2041 = vmatmul.mubr.bf16.gmra.mrb[0].mxu0 %v1773
  %v2042 = vpop.f32.mrb[0].mxu0
  %v2043 = vadd.f32 0.0, %v2042
  %v2044 = vpop.f32.mrb[0].mxu0
  %v2045 = vpop.f32.mrb[0].mxu0
  %v2046 = vadd.f32 0.0, %v2045
  %v2047 = vpop.f32.mrb[0].mxu0
  %2048 = vmatprep.mubr.bf16.mxu0 0
  %2049 = vmatmul.mubr.bf16.gmra.mrb[0].mxu0 %v1776
  %v2050 = vpop.f32.mrb[0].mxu0
  %v2051 = vadd.f32 0.0, %v2050
  %v2052 = vpop.f32.mrb[0].mxu0
  %v2053 = vpop.f32.mrb[0].mxu0
  %v2054 = vadd.f32 0.0, %v2053
  %v2055 = vpop.f32.mrb[0].mxu0
  %2056 = vmatprep.mubr.bf16.mxu0 0
  %2057 = vmatmul.mubr.bf16.gmra.mrb[0].mxu0 %v1779
  %v2058 = vpop.f32.mrb[0].mxu0
  %v2059 = vadd.f32 0.0, %v2058
  %v2060 = vpop.f32.mrb[0].mxu0
  %v2061 = vpop.f32.mrb[0].mxu0
  %v2062 = vadd.f32 0.0, %v2061
  %v2063 = vpop.f32.mrb[0].mxu0
  %2064 = vmatprep.mubr.bf16.mxu0 0
  %2065 = vmatmul.mubr.bf16.gmra.mrb[0].mxu0 %v1782
  %v2066 = vpop.f32.mrb[0].mxu0
  %v2067 = vadd.f32 0.0, %v2066
  %v2068 = vpop.f32.mrb[0].mxu0
  %v2069 = vpop.f32.mrb[0].mxu0
  %v2070 = vadd.f32 0.0, %v2069
  %v2071 = vpop.f32.mrb[0].mxu0
  %2072 = vdwg.mxu0
  %v2073 = vadd.f32 %v1510, %v1819
  %v2074 = vadd.f32 %v1511, %v1822
  %v2075 = vadd.f32 %v1512, %v1827
  %v2076 = vadd.f32 %v1513, %v1830
  %v2077 = vadd.f32 %v1514, %v1835
  %v2078 = vadd.f32 %v1515, %v1838
  %v2079 = vadd.f32 %v1516, %v1843
  %v2080 = vadd.f32 %v1517, %v1846
  %v2081 = vadd.f32 %v1518, %v1851
  %v2082 = vadd.f32 %v1519, %v1854
  %v2083 = vadd.f32 %v1520, %v1859
  %v2084 = vadd.f32 %v1521, %v1862
  %v2085 = vadd.f32 %v1522, %v1867
  %v2086 = vadd.f32 %v1523, %v1870
  %v2087 = vadd.f32 %v1524, %v1875
  %v2088 = vadd.f32 %v1525, %v1878
  %v2089 = vadd.f32 %v1526, %v1883
  %v2090 = vadd.f32 %v1527, %v1886
  %v2091 = vadd.f32 %v1528, %v1891
  %v2092 = vadd.f32 %v1529, %v1894
  %v2093 = vadd.f32 %v1530, %v1899
  %v2094 = vadd.f32 %v1531, %v1902
  %v2095 = vadd.f32 %v1532, %v1907
  %v2096 = vadd.f32 %v1533, %v1910
  %v2097 = vadd.f32 %v1534, %v1915
  %v2098 = vadd.f32 %v1535, %v1918
  %v2099 = vadd.f32 %v1536, %v1923
  %v2100 = vadd.f32 %v1537, %v1926
  %v2101 = vadd.f32 %v1538, %v1931
  %v2102 = vadd.f32 %v1539, %v1934
  %v2103 = vadd.f32 %v1540, %v1939
  %v2104 = vadd.f32 %v1541, %v1942
  %v2105 = vadd.f32 %v1542, %v1947
  %v2106 = vadd.f32 %v1543, %v1950
  %v2107 = vadd.f32 %v1544, %v1955
  %v2108 = vadd.f32 %v1545, %v1958
  %v2109 = vadd.f32 %v1546, %v1963
  %v2110 = vadd.f32 %v1547, %v1966
  %v2111 = vadd.f32 %v1548, %v1971
  %v2112 = vadd.f32 %v1549, %v1974
  %v2113 = vadd.f32 %v1550, %v1979
  %v2114 = vadd.f32 %v1551, %v1982
  %v2115 = vadd.f32 %v1552, %v1987
  %v2116 = vadd.f32 %v1553, %v1990
  %v2117 = vadd.f32 %v1554, %v1995
  %v2118 = vadd.f32 %v1555, %v1998
  %v2119 = vadd.f32 %v1556, %v2003
  %v2120 = vadd.f32 %v1557, %v2006
  %v2121 = vadd.f32 %v1558, %v2011
  %v2122 = vadd.f32 %v1559, %v2014
  %v2123 = vadd.f32 %v1560, %v2019
  %v2124 = vadd.f32 %v1561, %v2022
  %v2125 = vadd.f32 %v1562, %v2027
  %v2126 = vadd.f32 %v1563, %v2030
  %v2127 = vadd.f32 %v1564, %v2035
  %v2128 = vadd.f32 %v1565, %v2038
  %v2129 = vadd.f32 %v1566, %v2043
  %v2130 = vadd.f32 %v1567, %v2046
  %v2131 = vadd.f32 %v1568, %v2051
  %v2132 = vadd.f32 %v1569, %v2054
  %v2133 = vadd.f32 %v1570, %v2059
  %v2134 = vadd.f32 %v1571, %v2062
  %v2135 = vadd.f32 %v1572, %v2067
  %v2136 = vadd.f32 %v1573, %v2070
  %s2137 = scalar_lea.vmem %s0, 2448
  %v2138 = vld [vmem:[%s2137] sm:$0xff]
  %v2139 = vld [vmem:[%s2137 + $0x8] sm:$0xff]
  %v2140 = vld [vmem:[%s2137 + $0x18] sm:$0xff]
  %v2141 = vld [vmem:[%s2137 + $0x20] sm:$0xff]
  %v2142 = vld [vmem:[%s2137 + $0x30] sm:$0xff]
  %v2143 = vld [vmem:[%s2137 + $0x38] sm:$0xff]
  %v2144 = vld [vmem:[%s2137 + $0x48] sm:$0xff]
  %v2145 = vld [vmem:[%s2137 + $0x50] sm:$0xff]
  %v2146 = vld [vmem:[%s2137 + $0x60] sm:$0xff]
  %v2147 = vld [vmem:[%s2137 + $0x68] sm:$0xff]
  %v2148 = vld [vmem:[%s2137 + $0x78] sm:$0xff]
  %v2149 = vld [vmem:[%s2137 + $0x80] sm:$0xff]
  %v2150 = vld [vmem:[%s2137 + $0x90] sm:$0xff]
  %v2151 = vld [vmem:[%s2137 + $0x98] sm:$0xff]
  %v2152 = vld [vmem:[%s2137 + $0xa8] sm:$0xff]
  %v2153 = vld [vmem:[%s2137 + $0xb0] sm:$0xff]
  %v2154 = vld [vmem:[%s2137 + $0xc0] sm:$0xff]
  %v2155 = vld [vmem:[%s2137 + $0xc8] sm:$0xff]
  %v2156 = vld [vmem:[%s2137 + $0xd8] sm:$0xff]
  %v2157 = vld [vmem:[%s2137 + $0xe0] sm:$0xff]
  %v2158 = vld [vmem:[%s2137 + $0xf0] sm:$0xff]
  %v2159 = vld [vmem:[%s2137 + $0xf8] sm:$0xff]
  %v2160 = vld [vmem:[%s2137 + $0x108] sm:$0xff]
  %v2161 = vld [vmem:[%s2137 + $0x110] sm:$0xff]
  %v2162 = vld [vmem:[%s2137 + $0x120] sm:$0xff]
  %v2163 = vld [vmem:[%s2137 + $0x128] sm:$0xff]
  %v2164 = vld [vmem:[%s2137 + $0x138] sm:$0xff]
  %v2165 = vld [vmem:[%s2137 + $0x140] sm:$0xff]
  %v2166 = vld [vmem:[%s2137 + $0x150] sm:$0xff]
  %v2167 = vld [vmem:[%s2137 + $0x158] sm:$0xff]
  %v2168 = vld [vmem:[%s2137 + $0x168] sm:$0xff]
  %v2169 = vld [vmem:[%s2137 + $0x170] sm:$0xff]
  %v2170 = vld [vmem:[%s2137 + $0x198] sm:$0xff]
  %v2171 = vld [vmem:[%s2137 + $0x1a0] sm:$0xff]
  %v2172 = vld [vmem:[%s2137 + $0x1b0] sm:$0xff]
  %v2173 = vld [vmem:[%s2137 + $0x1b8] sm:$0xff]
  %v2174 = vld [vmem:[%s2137 + $0x1c8] sm:$0xff]
  %v2175 = vld [vmem:[%s2137 + $0x1d0] sm:$0xff]
  %v2176 = vld [vmem:[%s2137 + $0x1e0] sm:$0xff]
  %v2177 = vld [vmem:[%s2137 + $0x1e8] sm:$0xff]
  %v2178 = vld [vmem:[%s2137 + $0x1f8] sm:$0xff]
  %v2179 = vld [vmem:[%s2137 + $0x200] sm:$0xff]
  %v2180 = vld [vmem:[%s2137 + $0x210] sm:$0xff]
  %v2181 = vld [vmem:[%s2137 + $0x218] sm:$0xff]
  %v2182 = vld [vmem:[%s2137 + $0x228] sm:$0xff]
  %v2183 = vld [vmem:[%s2137 + $0x230] sm:$0xff]
  %v2184 = vld [vmem:[%s2137 + $0x240] sm:$0xff]
  %v2185 = vld [vmem:[%s2137 + $0x248] sm:$0xff]
  %v2186 = vld [vmem:[%s2137 + $0x258] sm:$0xff]
  %v2187 = vld [vmem:[%s2137 + $0x260] sm:$0xff]
  %v2188 = vld [vmem:[%s2137 + $0x270] sm:$0xff]
  %v2189 = vld [vmem:[%s2137 + $0x278] sm:$0xff]
  %v2190 = vld [vmem:[%s2137 + $0x288] sm:$0xff]
  %v2191 = vld [vmem:[%s2137 + $0x290] sm:$0xff]
  %v2192 = vld [vmem:[%s2137 + $0x2a0] sm:$0xff]
  %v2193 = vld [vmem:[%s2137 + $0x2a8] sm:$0xff]
  %v2194 = vld [vmem:[%s2137 + $0x2b8] sm:$0xff]
  %v2195 = vld [vmem:[%s2137 + $0x2c0] sm:$0xff]
  %v2196 = vld [vmem:[%s2137 + $0x2d0] sm:$0xff]
  %v2197 = vld [vmem:[%s2137 + $0x2d8] sm:$0xff]
  %v2198 = vld [vmem:[%s2137 + $0x2e8] sm:$0xff]
  %v2199 = vld [vmem:[%s2137 + $0x2f0] sm:$0xff]
  %v2200 = vld [vmem:[%s2137 + $0x300] sm:$0xff]
  %v2201 = vld [vmem:[%s2137 + $0x308] sm:$0xff]
  %v2202 = vpack.c.bf16 %v2139, %v2138
  %v2203 = vpack.c.bf16 %v2141, %v2140
  %v2204 = vpack.c.bf16 %v2143, %v2142
  %v2205 = vpack.c.bf16 %v2145, %v2144
  %v2206 = vpack.c.bf16 %v2147, %v2146
  %v2207 = vpack.c.bf16 %v2149, %v2148
  %v2208 = vpack.c.bf16 %v2151, %v2150
  %v2209 = vpack.c.bf16 %v2153, %v2152
  %v2210 = vpack.c.bf16 %v2155, %v2154
  %v2211 = vpack.c.bf16 %v2157, %v2156
  %v2212 = vpack.c.bf16 %v2159, %v2158
  %v2213 = vpack.c.bf16 %v2161, %v2160
  %v2214 = vpack.c.bf16 %v2163, %v2162
  %v2215 = vpack.c.bf16 %v2165, %v2164
  %v2216 = vpack.c.bf16 %v2167, %v2166
  %v2217 = vpack.c.bf16 %v2169, %v2168
  %v2218 = vpack.c.bf16 %v2171, %v2170
  %v2219 = vpack.c.bf16 %v2173, %v2172
  %v2220 = vpack.c.bf16 %v2175, %v2174
  %v2221 = vpack.c.bf16 %v2177, %v2176
  %v2222 = vpack.c.bf16 %v2179, %v2178
  %v2223 = vpack.c.bf16 %v2181, %v2180
  %v2224 = vpack.c.bf16 %v2183, %v2182
  %v2225 = vpack.c.bf16 %v2185, %v2184
  %v2226 = vpack.c.bf16 %v2187, %v2186
  %v2227 = vpack.c.bf16 %v2189, %v2188
  %v2228 = vpack.c.bf16 %v2191, %v2190
  %v2229 = vpack.c.bf16 %v2193, %v2192
  %v2230 = vpack.c.bf16 %v2195, %v2194
  %v2231 = vpack.c.bf16 %v2197, %v2196
  %v2232 = vpack.c.bf16 %v2199, %v2198
  %v2233 = vpack.c.bf16 %v2201, %v2200
  %s2234 = scalar_lea.vmem %s1, 64
  %v2235 = vld [vmem:[%s2234] sm:$0xf]
  %v2236 = vld [vmem:[%s2234 + $0x4] sm:$0xf]
  %v2237 = vld [vmem:[%s2234 + $0x8] sm:$0xf]
  %v2238 = vld [vmem:[%s2234 + $0xc] sm:$0xf]
  %v2243 = vunpack.c.l.b16 %v2235
  %v2244 = vunpack.c.l.b16 %v2236
  %v2245 = vunpack.c.l.b16 %v2237
  %v2246 = vunpack.c.l.b16 %v2238
  %v2247 = vpack.c.b16 %v2244, %v2243
  %v2248 = vpack.c.b16 %v2246, %v2245
  %v2252 = vsel %vm229, %v2202, 0
  %v2255 = vsel %vm229, %v2203, 0
  %v2258 = vsel %vm229, %v2204, 0
  %v2261 = vsel %vm229, %v2205, 0
  %v2264 = vsel %vm229, %v2206, 0
  %v2267 = vsel %vm229, %v2207, 0
  %v2270 = vsel %vm229, %v2208, 0
  %v2273 = vsel %vm229, %v2209, 0
  %v2276 = vsel %vm229, %v2210, 0
  %v2279 = vsel %vm229, %v2211, 0
  %v2282 = vsel %vm229, %v2212, 0
  %v2285 = vsel %vm229, %v2213, 0
  %v2288 = vsel %vm229, %v2214, 0
  %v2291 = vsel %vm229, %v2215, 0
  %v2294 = vsel %vm229, %v2216, 0
  %v2297 = vsel %vm229, %v2217, 0
  %v2300 = vsel %vm229, %v2218, 0
  %v2303 = vsel %vm229, %v2219, 0
  %v2306 = vsel %vm229, %v2220, 0
  %v2309 = vsel %vm229, %v2221, 0
  %v2312 = vsel %vm229, %v2222, 0
  %v2315 = vsel %vm229, %v2223, 0
  %v2318 = vsel %vm229, %v2224, 0
  %v2321 = vsel %vm229, %v2225, 0
  %v2324 = vsel %vm229, %v2226, 0
  %v2327 = vsel %vm229, %v2227, 0
  %v2330 = vsel %vm229, %v2228, 0
  %v2333 = vsel %vm229, %v2229, 0
  %v2336 = vsel %vm229, %v2230, 0
  %v2339 = vsel %vm229, %v2231, 0
  %v2342 = vsel %vm229, %v2232, 0
  %v2345 = vsel %vm229, %v2233, 0
  %2347 = vmatprep.subr.bf16.mxu0 0
  %2348 = vmatpush1.bf16.msra.mxu0 %v2247
  %2349 = vmatprep.subr.bf16.mxu0 0
  %2350 = vmatpush1.bf16.msra.mxu0 %v2248
  %2351 = vmatprep.subr.bf16.mxu0 0
  %2352 = vmatpush1.bf16.msra.mxu0 0
  %2353 = vmatprep.subr.bf16.mxu0 0
  %2354 = vmatpush1.bf16.msra.mxu0 0
  %2355 = vmatprep.subr.bf16.mxu0 0
  %2356 = vmatpush1.bf16.msra.mxu0 0
  %2357 = vmatprep.subr.bf16.mxu0 0
  %2358 = vmatpush1.bf16.msra.mxu0 0
  %2359 = vmatprep.subr.bf16.mxu0 0
  %2360 = vmatpush1.bf16.msra.mxu0 0
  %2361 = vmatprep.subr.bf16.mxu0 0
  %2362 = vmatpush1.bf16.msra.mxu0 0
  %2363 = vmatprep.subr.bf16.mxu0 0
  %2364 = vmatpush1.bf16.msra.mxu0 0
  %2365 = vmatprep.subr.bf16.mxu0 0
  %2366 = vmatpush1.bf16.msra.mxu0 0
  %2367 = vmatprep.subr.bf16.mxu0 0
  %2368 = vmatpush1.bf16.msra.mxu0 0
  %2369 = vmatprep.subr.bf16.mxu0 0
  %2370 = vmatpush1.bf16.msra.mxu0 0
  %2371 = vmatprep.subr.bf16.mxu0 0
  %2372 = vmatpush1.bf16.msra.mxu0 0
  %2373 = vmatprep.subr.bf16.mxu0 0
  %2374 = vmatpush1.bf16.msra.mxu0 0
  %2375 = vmatprep.subr.bf16.mxu0 0
  %2376 = vmatpush1.bf16.msra.mxu0 0
  %2377 = vmatprep.subr.bf16.mxu0 0
  %2378 = vmatpush1.bf16.msra.mxu0 0
  %2379 = vmatprep.mubr.bf16.mxu0 0
  %2380 = vmatmul.mubr.bf16.gmra.mrb[0].mxu0 %v2252
  %v2381 = vpop.f32.mrb[0].mxu0
  %v2382 = vadd.f32 0.0, %v2381
  %v2383 = vpop.f32.mrb[0].mxu0
  %v2384 = vpop.f32.mrb[0].mxu0
  %v2385 = vadd.f32 0.0, %v2384
  %v2386 = vpop.f32.mrb[0].mxu0
  %2387 = vmatprep.mubr.bf16.mxu0 0
  %2388 = vmatmul.mubr.bf16.gmra.mrb[0].mxu0 %v2255
  %v2389 = vpop.f32.mrb[0].mxu0
  %v2390 = vadd.f32 0.0, %v2389
  %v2391 = vpop.f32.mrb[0].mxu0
  %v2392 = vpop.f32.mrb[0].mxu0
  %v2393 = vadd.f32 0.0, %v2392
  %v2394 = vpop.f32.mrb[0].mxu0
  %2395 = vmatprep.mubr.bf16.mxu0 0
  %2396 = vmatmul.mubr.bf16.gmra.mrb[0].mxu0 %v2258
  %v2397 = vpop.f32.mrb[0].mxu0
  %v2398 = vadd.f32 0.0, %v2397
  %v2399 = vpop.f32.mrb[0].mxu0
  %v2400 = vpop.f32.mrb[0].mxu0
  %v2401 = vadd.f32 0.0, %v2400
  %v2402 = vpop.f32.mrb[0].mxu0
  %2403 = vmatprep.mubr.bf16.mxu0 0
  %2404 = vmatmul.mubr.bf16.gmra.mrb[0].mxu0 %v2261
  %v2405 = vpop.f32.mrb[0].mxu0
  %v2406 = vadd.f32 0.0, %v2405
  %v2407 = vpop.f32.mrb[0].mxu0
  %v2408 = vpop.f32.mrb[0].mxu0
  %v2409 = vadd.f32 0.0, %v2408
  %v2410 = vpop.f32.mrb[0].mxu0
  %2411 = vmatprep.mubr.bf16.mxu0 0
  %2412 = vmatmul.mubr.bf16.gmra.mrb[0].mxu0 %v2264
  %v2413 = vpop.f32.mrb[0].mxu0
  %v2414 = vadd.f32 0.0, %v2413
  %v2415 = vpop.f32.mrb[0].mxu0
  %v2416 = vpop.f32.mrb[0].mxu0
  %v2417 = vadd.f32 0.0, %v2416
  %v2418 = vpop.f32.mrb[0].mxu0
  %2419 = vmatprep.mubr.bf16.mxu0 0
  %2420 = vmatmul.mubr.bf16.gmra.mrb[0].mxu0 %v2267
  %v2421 = vpop.f32.mrb[0].mxu0
  %v2422 = vadd.f32 0.0, %v2421
  %v2423 = vpop.f32.mrb[0].mxu0
  %v2424 = vpop.f32.mrb[0].mxu0
  %v2425 = vadd.f32 0.0, %v2424
  %v2426 = vpop.f32.mrb[0].mxu0
  %2427 = vmatprep.mubr.bf16.mxu0 0
  %2428 = vmatmul.mubr.bf16.gmra.mrb[0].mxu0 %v2270
  %v2429 = vpop.f32.mrb[0].mxu0
  %v2430 = vadd.f32 0.0, %v2429
  %v2431 = vpop.f32.mrb[0].mxu0
  %v2432 = vpop.f32.mrb[0].mxu0
  %v2433 = vadd.f32 0.0, %v2432
  %v2434 = vpop.f32.mrb[0].mxu0
  %2435 = vmatprep.mubr.bf16.mxu0 0
  %2436 = vmatmul.mubr.bf16.gmra.mrb[0].mxu0 %v2273
  %v2437 = vpop.f32.mrb[0].mxu0
  %v2438 = vadd.f32 0.0, %v2437
  %v2439 = vpop.f32.mrb[0].mxu0
  %v2440 = vpop.f32.mrb[0].mxu0
  %v2441 = vadd.f32 0.0, %v2440
  %v2442 = vpop.f32.mrb[0].mxu0
  %2443 = vmatprep.mubr.bf16.mxu0 0
  %2444 = vmatmul.mubr.bf16.gmra.mrb[0].mxu0 %v2276
  %v2445 = vpop.f32.mrb[0].mxu0
  %v2446 = vadd.f32 0.0, %v2445
  %v2447 = vpop.f32.mrb[0].mxu0
  %v2448 = vpop.f32.mrb[0].mxu0
  %v2449 = vadd.f32 0.0, %v2448
  %v2450 = vpop.f32.mrb[0].mxu0
  %2451 = vmatprep.mubr.bf16.mxu0 0
  %2452 = vmatmul.mubr.bf16.gmra.mrb[0].mxu0 %v2279
  %v2453 = vpop.f32.mrb[0].mxu0
  %v2454 = vadd.f32 0.0, %v2453
  %v2455 = vpop.f32.mrb[0].mxu0
  %v2456 = vpop.f32.mrb[0].mxu0
  %v2457 = vadd.f32 0.0, %v2456
  %v2458 = vpop.f32.mrb[0].mxu0
  %2459 = vmatprep.mubr.bf16.mxu0 0
  %2460 = vmatmul.mubr.bf16.gmra.mrb[0].mxu0 %v2282
  %v2461 = vpop.f32.mrb[0].mxu0
  %v2462 = vadd.f32 0.0, %v2461
  %v2463 = vpop.f32.mrb[0].mxu0
  %v2464 = vpop.f32.mrb[0].mxu0
  %v2465 = vadd.f32 0.0, %v2464
  %v2466 = vpop.f32.mrb[0].mxu0
  %2467 = vmatprep.mubr.bf16.mxu0 0
  %2468 = vmatmul.mubr.bf16.gmra.mrb[0].mxu0 %v2285
  %v2469 = vpop.f32.mrb[0].mxu0
  %v2470 = vadd.f32 0.0, %v2469
  %v2471 = vpop.f32.mrb[0].mxu0
  %v2472 = vpop.f32.mrb[0].mxu0
  %v2473 = vadd.f32 0.0, %v2472
  %v2474 = vpop.f32.mrb[0].mxu0
  %2475 = vmatprep.mubr.bf16.mxu0 0
  %2476 = vmatmul.mubr.bf16.gmra.mrb[0].mxu0 %v2288
  %v2477 = vpop.f32.mrb[0].mxu0
  %v2478 = vadd.f32 0.0, %v2477
  %v2479 = vpop.f32.mrb[0].mxu0
  %v2480 = vpop.f32.mrb[0].mxu0
  %v2481 = vadd.f32 0.0, %v2480
  %v2482 = vpop.f32.mrb[0].mxu0
  %2483 = vmatprep.mubr.bf16.mxu0 0
  %2484 = vmatmul.mubr.bf16.gmra.mrb[0].mxu0 %v2291
  %v2485 = vpop.f32.mrb[0].mxu0
  %v2486 = vadd.f32 0.0, %v2485
  %v2487 = vpop.f32.mrb[0].mxu0
  %v2488 = vpop.f32.mrb[0].mxu0
  %v2489 = vadd.f32 0.0, %v2488
  %v2490 = vpop.f32.mrb[0].mxu0
  %2491 = vmatprep.mubr.bf16.mxu0 0
  %2492 = vmatmul.mubr.bf16.gmra.mrb[0].mxu0 %v2294
  %v2493 = vpop.f32.mrb[0].mxu0
  %v2494 = vadd.f32 0.0, %v2493
  %v2495 = vpop.f32.mrb[0].mxu0
  %v2496 = vpop.f32.mrb[0].mxu0
  %v2497 = vadd.f32 0.0, %v2496
  %v2498 = vpop.f32.mrb[0].mxu0
  %2499 = vmatprep.mubr.bf16.mxu0 0
  %2500 = vmatmul.mubr.bf16.gmra.mrb[0].mxu0 %v2297
  %v2501 = vpop.f32.mrb[0].mxu0
  %v2502 = vadd.f32 0.0, %v2501
  %v2503 = vpop.f32.mrb[0].mxu0
  %v2504 = vpop.f32.mrb[0].mxu0
  %v2505 = vadd.f32 0.0, %v2504
  %v2506 = vpop.f32.mrb[0].mxu0
  %2507 = vmatprep.mubr.bf16.mxu0 0
  %2508 = vmatmul.mubr.bf16.gmra.mrb[0].mxu0 %v2300
  %v2509 = vpop.f32.mrb[0].mxu0
  %v2510 = vadd.f32 0.0, %v2509
  %v2511 = vpop.f32.mrb[0].mxu0
  %v2512 = vpop.f32.mrb[0].mxu0
  %v2513 = vadd.f32 0.0, %v2512
  %v2514 = vpop.f32.mrb[0].mxu0
  %2515 = vmatprep.mubr.bf16.mxu0 0
  %2516 = vmatmul.mubr.bf16.gmra.mrb[0].mxu0 %v2303
  %v2517 = vpop.f32.mrb[0].mxu0
  %v2518 = vadd.f32 0.0, %v2517
  %v2519 = vpop.f32.mrb[0].mxu0
  %v2520 = vpop.f32.mrb[0].mxu0
  %v2521 = vadd.f32 0.0, %v2520
  %v2522 = vpop.f32.mrb[0].mxu0
  %2523 = vmatprep.mubr.bf16.mxu0 0
  %2524 = vmatmul.mubr.bf16.gmra.mrb[0].mxu0 %v2306
  %v2525 = vpop.f32.mrb[0].mxu0
  %v2526 = vadd.f32 0.0, %v2525
  %v2527 = vpop.f32.mrb[0].mxu0
  %v2528 = vpop.f32.mrb[0].mxu0
  %v2529 = vadd.f32 0.0, %v2528
  %v2530 = vpop.f32.mrb[0].mxu0
  %2531 = vmatprep.mubr.bf16.mxu0 0
  %2532 = vmatmul.mubr.bf16.gmra.mrb[0].mxu0 %v2309
  %v2533 = vpop.f32.mrb[0].mxu0
  %v2534 = vadd.f32 0.0, %v2533
  %v2535 = vpop.f32.mrb[0].mxu0
  %v2536 = vpop.f32.mrb[0].mxu0
  %v2537 = vadd.f32 0.0, %v2536
  %v2538 = vpop.f32.mrb[0].mxu0
  %2539 = vmatprep.mubr.bf16.mxu0 0
  %2540 = vmatmul.mubr.bf16.gmra.mrb[0].mxu0 %v2312
  %v2541 = vpop.f32.mrb[0].mxu0
  %v2542 = vadd.f32 0.0, %v2541
  %v2543 = vpop.f32.mrb[0].mxu0
  %v2544 = vpop.f32.mrb[0].mxu0
  %v2545 = vadd.f32 0.0, %v2544
  %v2546 = vpop.f32.mrb[0].mxu0
  %2547 = vmatprep.mubr.bf16.mxu0 0
  %2548 = vmatmul.mubr.bf16.gmra.mrb[0].mxu0 %v2315
  %v2549 = vpop.f32.mrb[0].mxu0
  %v2550 = vadd.f32 0.0, %v2549
  %v2551 = vpop.f32.mrb[0].mxu0
  %v2552 = vpop.f32.mrb[0].mxu0
  %v2553 = vadd.f32 0.0, %v2552
  %v2554 = vpop.f32.mrb[0].mxu0
  %2555 = vmatprep.mubr.bf16.mxu0 0
  %2556 = vmatmul.mubr.bf16.gmra.mrb[0].mxu0 %v2318
  %v2557 = vpop.f32.mrb[0].mxu0
  %v2558 = vadd.f32 0.0, %v2557
  %v2559 = vpop.f32.mrb[0].mxu0
  %v2560 = vpop.f32.mrb[0].mxu0
  %v2561 = vadd.f32 0.0, %v2560
  %v2562 = vpop.f32.mrb[0].mxu0
  %2563 = vmatprep.mubr.bf16.mxu0 0
  %2564 = vmatmul.mubr.bf16.gmra.mrb[0].mxu0 %v2321
  %v2565 = vpop.f32.mrb[0].mxu0
  %v2566 = vadd.f32 0.0, %v2565
  %v2567 = vpop.f32.mrb[0].mxu0
  %v2568 = vpop.f32.mrb[0].mxu0
  %v2569 = vadd.f32 0.0, %v2568
  %v2570 = vpop.f32.mrb[0].mxu0
  %2571 = vmatprep.mubr.bf16.mxu0 0
  %2572 = vmatmul.mubr.bf16.gmra.mrb[0].mxu0 %v2324
  %v2573 = vpop.f32.mrb[0].mxu0
  %v2574 = vadd.f32 0.0, %v2573
  %v2575 = vpop.f32.mrb[0].mxu0
  %v2576 = vpop.f32.mrb[0].mxu0
  %v2577 = vadd.f32 0.0, %v2576
  %v2578 = vpop.f32.mrb[0].mxu0
  %2579 = vmatprep.mubr.bf16.mxu0 0
  %2580 = vmatmul.mubr.bf16.gmra.mrb[0].mxu0 %v2327
  %v2581 = vpop.f32.mrb[0].mxu0
  %v2582 = vadd.f32 0.0, %v2581
  %v2583 = vpop.f32.mrb[0].mxu0
  %v2584 = vpop.f32.mrb[0].mxu0
  %v2585 = vadd.f32 0.0, %v2584
  %v2586 = vpop.f32.mrb[0].mxu0
  %2587 = vmatprep.mubr.bf16.mxu0 0
  %2588 = vmatmul.mubr.bf16.gmra.mrb[0].mxu0 %v2330
  %v2589 = vpop.f32.mrb[0].mxu0
  %v2590 = vadd.f32 0.0, %v2589
  %v2591 = vpop.f32.mrb[0].mxu0
  %v2592 = vpop.f32.mrb[0].mxu0
  %v2593 = vadd.f32 0.0, %v2592
  %v2594 = vpop.f32.mrb[0].mxu0
  %2595 = vmatprep.mubr.bf16.mxu0 0
  %2596 = vmatmul.mubr.bf16.gmra.mrb[0].mxu0 %v2333
  %v2597 = vpop.f32.mrb[0].mxu0
  %v2598 = vadd.f32 0.0, %v2597
  %v2599 = vpop.f32.mrb[0].mxu0
  %v2600 = vpop.f32.mrb[0].mxu0
  %v2601 = vadd.f32 0.0, %v2600
  %v2602 = vpop.f32.mrb[0].mxu0
  %2603 = vmatprep.mubr.bf16.mxu0 0
  %2604 = vmatmul.mubr.bf16.gmra.mrb[0].mxu0 %v2336
  %v2605 = vpop.f32.mrb[0].mxu0
  %v2606 = vadd.f32 0.0, %v2605
  %v2607 = vpop.f32.mrb[0].mxu0
  %v2608 = vpop.f32.mrb[0].mxu0
  %v2609 = vadd.f32 0.0, %v2608
  %v2610 = vpop.f32.mrb[0].mxu0
  %2611 = vmatprep.mubr.bf16.mxu0 0
  %2612 = vmatmul.mubr.bf16.gmra.mrb[0].mxu0 %v2339
  %v2613 = vpop.f32.mrb[0].mxu0
  %v2614 = vadd.f32 0.0, %v2613
  %v2615 = vpop.f32.mrb[0].mxu0
  %v2616 = vpop.f32.mrb[0].mxu0
  %v2617 = vadd.f32 0.0, %v2616
  %v2618 = vpop.f32.mrb[0].mxu0
  %2619 = vmatprep.mubr.bf16.mxu0 0
  %2620 = vmatmul.mubr.bf16.gmra.mrb[0].mxu0 %v2342
  %v2621 = vpop.f32.mrb[0].mxu0
  %v2622 = vadd.f32 0.0, %v2621
  %v2623 = vpop.f32.mrb[0].mxu0
  %v2624 = vpop.f32.mrb[0].mxu0
  %v2625 = vadd.f32 0.0, %v2624
  %v2626 = vpop.f32.mrb[0].mxu0
  %2627 = vmatprep.mubr.bf16.mxu0 0
  %2628 = vmatmul.mubr.bf16.gmra.mrb[0].mxu0 %v2345
  %v2629 = vpop.f32.mrb[0].mxu0
  %v2630 = vadd.f32 0.0, %v2629
  %v2631 = vpop.f32.mrb[0].mxu0
  %v2632 = vpop.f32.mrb[0].mxu0
  %v2633 = vadd.f32 0.0, %v2632
  %v2634 = vpop.f32.mrb[0].mxu0
  %2635 = vdwg.mxu0
  %v2636 = vadd.f32 %v2073, %v2382
  %v2637 = vadd.f32 %v2074, %v2385
  %v2638 = vadd.f32 %v2075, %v2390
  %v2639 = vadd.f32 %v2076, %v2393
  %v2640 = vadd.f32 %v2077, %v2398
  %v2641 = vadd.f32 %v2078, %v2401
  %v2642 = vadd.f32 %v2079, %v2406
  %v2643 = vadd.f32 %v2080, %v2409
  %v2644 = vadd.f32 %v2081, %v2414
  %v2645 = vadd.f32 %v2082, %v2417
  %v2646 = vadd.f32 %v2083, %v2422
  %v2647 = vadd.f32 %v2084, %v2425
  %v2648 = vadd.f32 %v2085, %v2430
  %v2649 = vadd.f32 %v2086, %v2433
  %v2650 = vadd.f32 %v2087, %v2438
  %v2651 = vadd.f32 %v2088, %v2441
  %v2652 = vadd.f32 %v2089, %v2446
  %v2653 = vadd.f32 %v2090, %v2449
  %v2654 = vadd.f32 %v2091, %v2454
  %v2655 = vadd.f32 %v2092, %v2457
  %v2656 = vadd.f32 %v2093, %v2462
  %v2657 = vadd.f32 %v2094, %v2465
  %v2658 = vadd.f32 %v2095, %v2470
  %v2659 = vadd.f32 %v2096, %v2473
  %v2660 = vadd.f32 %v2097, %v2478
  %v2661 = vadd.f32 %v2098, %v2481
  %v2662 = vadd.f32 %v2099, %v2486
  %v2663 = vadd.f32 %v2100, %v2489
  %v2664 = vadd.f32 %v2101, %v2494
  %v2665 = vadd.f32 %v2102, %v2497
  %v2666 = vadd.f32 %v2103, %v2502
  %v2667 = vadd.f32 %v2104, %v2505
  %v2668 = vadd.f32 %v2105, %v2510
  %v2669 = vadd.f32 %v2106, %v2513
  %v2670 = vadd.f32 %v2107, %v2518
  %v2671 = vadd.f32 %v2108, %v2521
  %v2672 = vadd.f32 %v2109, %v2526
  %v2673 = vadd.f32 %v2110, %v2529
  %v2674 = vadd.f32 %v2111, %v2534
  %v2675 = vadd.f32 %v2112, %v2537
  %v2676 = vadd.f32 %v2113, %v2542
  %v2677 = vadd.f32 %v2114, %v2545
  %v2678 = vadd.f32 %v2115, %v2550
  %v2679 = vadd.f32 %v2116, %v2553
  %v2680 = vadd.f32 %v2117, %v2558
  %v2681 = vadd.f32 %v2118, %v2561
  %v2682 = vadd.f32 %v2119, %v2566
  %v2683 = vadd.f32 %v2120, %v2569
  %v2684 = vadd.f32 %v2121, %v2574
  %v2685 = vadd.f32 %v2122, %v2577
  %v2686 = vadd.f32 %v2123, %v2582
  %v2687 = vadd.f32 %v2124, %v2585
  %v2688 = vadd.f32 %v2125, %v2590
  %v2689 = vadd.f32 %v2126, %v2593
  %v2690 = vadd.f32 %v2127, %v2598
  %v2691 = vadd.f32 %v2128, %v2601
  %v2692 = vadd.f32 %v2129, %v2606
  %v2693 = vadd.f32 %v2130, %v2609
  %v2694 = vadd.f32 %v2131, %v2614
  %v2695 = vadd.f32 %v2132, %v2617
  %v2696 = vadd.f32 %v2133, %v2622
  %v2697 = vadd.f32 %v2134, %v2625
  %v2698 = vadd.f32 %v2135, %v2630
  %v2699 = vadd.f32 %v2136, %v2633
  %v2700 = vld [vmem:[%s1574 + $0x1] sm:$0xff]
  %v2701 = vld [vmem:[%s1574 + $0x9] sm:$0xff]
  %v2702 = vld [vmem:[%s1574 + $0x19] sm:$0xff]
  %v2703 = vld [vmem:[%s1574 + $0x21] sm:$0xff]
  %v2704 = vld [vmem:[%s1574 + $0x31] sm:$0xff]
  %v2705 = vld [vmem:[%s1574 + $0x39] sm:$0xff]
  %v2706 = vld [vmem:[%s1574 + $0x49] sm:$0xff]
  %v2707 = vld [vmem:[%s1574 + $0x51] sm:$0xff]
  %v2708 = vld [vmem:[%s1574 + $0x61] sm:$0xff]
  %v2709 = vld [vmem:[%s1574 + $0x69] sm:$0xff]
  %v2710 = vld [vmem:[%s1574 + $0x79] sm:$0xff]
  %v2711 = vld [vmem:[%s1574 + $0x81] sm:$0xff]
  %v2712 = vld [vmem:[%s1574 + $0x91] sm:$0xff]
  %v2713 = vld [vmem:[%s1574 + $0x99] sm:$0xff]
  %v2714 = vld [vmem:[%s1574 + $0xa9] sm:$0xff]
  %v2715 = vld [vmem:[%s1574 + $0xb1] sm:$0xff]
  %v2716 = vld [vmem:[%s1574 + $0xc1] sm:$0xff]
  %v2717 = vld [vmem:[%s1574 + $0xc9] sm:$0xff]
  %v2718 = vld [vmem:[%s1574 + $0xd9] sm:$0xff]
  %v2719 = vld [vmem:[%s1574 + $0xe1] sm:$0xff]
  %v2720 = vld [vmem:[%s1574 + $0xf1] sm:$0xff]
  %v2721 = vld [vmem:[%s1574 + $0xf9] sm:$0xff]
  %v2722 = vld [vmem:[%s1574 + $0x109] sm:$0xff]
  %v2723 = vld [vmem:[%s1574 + $0x111] sm:$0xff]
  %v2724 = vld [vmem:[%s1574 + $0x121] sm:$0xff]
  %v2725 = vld [vmem:[%s1574 + $0x129] sm:$0xff]
  %v2726 = vld [vmem:[%s1574 + $0x139] sm:$0xff]
  %v2727 = vld [vmem:[%s1574 + $0x141] sm:$0xff]
  %v2728 = vld [vmem:[%s1574 + $0x151] sm:$0xff]
  %v2729 = vld [vmem:[%s1574 + $0x159] sm:$0xff]
  %v2730 = vld [vmem:[%s1574 + $0x169] sm:$0xff]
  %v2731 = vld [vmem:[%s1574 + $0x171] sm:$0xff]
  %v2732 = vld [vmem:[%s1574 + $0x199] sm:$0xff]
  %v2733 = vld [vmem:[%s1574 + $0x1a1] sm:$0xff]
  %v2734 = vld [vmem:[%s1574 + $0x1b1] sm:$0xff]
  %v2735 = vld [vmem:[%s1574 + $0x1b9] sm:$0xff]
  %v2736 = vld [vmem:[%s1574 + $0x1c9] sm:$0xff]
  %v2737 = vld [vmem:[%s1574 + $0x1d1] sm:$0xff]
  %v2738 = vld [vmem:[%s1574 + $0x1e1] sm:$0xff]
  %v2739 = vld [vmem:[%s1574 + $0x1e9] sm:$0xff]
  %v2740 = vld [vmem:[%s1574 + $0x1f9] sm:$0xff]
  %v2741 = vld [vmem:[%s1574 + $0x201] sm:$0xff]
  %v2742 = vld [vmem:[%s1574 + $0x211] sm:$0xff]
  %v2743 = vld [vmem:[%s1574 + $0x219] sm:$0xff]
  %v2744 = vld [vmem:[%s1574 + $0x229] sm:$0xff]
  %v2745 = vld [vmem:[%s1574 + $0x231] sm:$0xff]
  %v2746 = vld [vmem:[%s1574 + $0x241] sm:$0xff]
  %v2747 = vld [vmem:[%s1574 + $0x249] sm:$0xff]
  %v2748 = vld [vmem:[%s1574 + $0x259] sm:$0xff]
  %v2749 = vld [vmem:[%s1574 + $0x261] sm:$0xff]
  %v2750 = vld [vmem:[%s1574 + $0x271] sm:$0xff]
  %v2751 = vld [vmem:[%s1574 + $0x279] sm:$0xff]
  %v2752 = vld [vmem:[%s1574 + $0x289] sm:$0xff]
  %v2753 = vld [vmem:[%s1574 + $0x291] sm:$0xff]
  %v2754 = vld [vmem:[%s1574 + $0x2a1] sm:$0xff]
  %v2755 = vld [vmem:[%s1574 + $0x2a9] sm:$0xff]
  %v2756 = vld [vmem:[%s1574 + $0x2b9] sm:$0xff]
  %v2757 = vld [vmem:[%s1574 + $0x2c1] sm:$0xff]
  %v2758 = vld [vmem:[%s1574 + $0x2d1] sm:$0xff]
  %v2759 = vld [vmem:[%s1574 + $0x2d9] sm:$0xff]
  %v2760 = vld [vmem:[%s1574 + $0x2e9] sm:$0xff]
  %v2761 = vld [vmem:[%s1574 + $0x2f1] sm:$0xff]
  %v2762 = vld [vmem:[%s1574 + $0x301] sm:$0xff]
  %v2763 = vld [vmem:[%s1574 + $0x309] sm:$0xff]
  %v2764 = vpack.c.bf16 %v2701, %v2700
  %v2765 = vpack.c.bf16 %v2703, %v2702
  %v2766 = vpack.c.bf16 %v2705, %v2704
  %v2767 = vpack.c.bf16 %v2707, %v2706
  %v2768 = vpack.c.bf16 %v2709, %v2708
  %v2769 = vpack.c.bf16 %v2711, %v2710
  %v2770 = vpack.c.bf16 %v2713, %v2712
  %v2771 = vpack.c.bf16 %v2715, %v2714
  %v2772 = vpack.c.bf16 %v2717, %v2716
  %v2773 = vpack.c.bf16 %v2719, %v2718
  %v2774 = vpack.c.bf16 %v2721, %v2720
  %v2775 = vpack.c.bf16 %v2723, %v2722
  %v2776 = vpack.c.bf16 %v2725, %v2724
  %v2777 = vpack.c.bf16 %v2727, %v2726
  %v2778 = vpack.c.bf16 %v2729, %v2728
  %v2779 = vpack.c.bf16 %v2731, %v2730
  %v2780 = vpack.c.bf16 %v2733, %v2732
  %v2781 = vpack.c.bf16 %v2735, %v2734
  %v2782 = vpack.c.bf16 %v2737, %v2736
  %v2783 = vpack.c.bf16 %v2739, %v2738
  %v2784 = vpack.c.bf16 %v2741, %v2740
  %v2785 = vpack.c.bf16 %v2743, %v2742
  %v2786 = vpack.c.bf16 %v2745, %v2744
  %v2787 = vpack.c.bf16 %v2747, %v2746
  %v2788 = vpack.c.bf16 %v2749, %v2748
  %v2789 = vpack.c.bf16 %v2751, %v2750
  %v2790 = vpack.c.bf16 %v2753, %v2752
  %v2791 = vpack.c.bf16 %v2755, %v2754
  %v2792 = vpack.c.bf16 %v2757, %v2756
  %v2793 = vpack.c.bf16 %v2759, %v2758
  %v2794 = vpack.c.bf16 %v2761, %v2760
  %v2795 = vpack.c.bf16 %v2763, %v2762
  %s2796 = scalar_lea.vmem %s1, 80
  %v2797 = vld [vmem:[%s2796] sm:$0xf]
  %v2798 = vld [vmem:[%s2796 + $0x4] sm:$0xf]
  %v2799 = vld [vmem:[%s2796 + $0x8] sm:$0xf]
  %v2800 = vld [vmem:[%s2796 + $0xc] sm:$0xf]
  %v2805 = vunpack.c.l.b16 %v2797
  %v2806 = vunpack.c.l.b16 %v2798
  %v2807 = vunpack.c.l.b16 %v2799
  %v2808 = vunpack.c.l.b16 %v2800
  %v2809 = vpack.c.b16 %v2806, %v2805
  %v2810 = vpack.c.b16 %v2808, %v2807
  %v2814 = vsel %vm229, %v2764, 0
  %v2817 = vsel %vm229, %v2765, 0
  %v2820 = vsel %vm229, %v2766, 0
  %v2823 = vsel %vm229, %v2767, 0
  %v2826 = vsel %vm229, %v2768, 0
  %v2829 = vsel %vm229, %v2769, 0
  %v2832 = vsel %vm229, %v2770, 0
  %v2835 = vsel %vm229, %v2771, 0
  %v2838 = vsel %vm229, %v2772, 0
  %v2841 = vsel %vm229, %v2773, 0
  %v2844 = vsel %vm229, %v2774, 0
  %v2847 = vsel %vm229, %v2775, 0
  %v2850 = vsel %vm229, %v2776, 0
  %v2853 = vsel %vm229, %v2777, 0
  %v2856 = vsel %vm229, %v2778, 0
  %v2859 = vsel %vm229, %v2779, 0
  %v2862 = vsel %vm229, %v2780, 0
  %v2865 = vsel %vm229, %v2781, 0
  %v2868 = vsel %vm229, %v2782, 0
  %v2871 = vsel %vm229, %v2783, 0
  %v2874 = vsel %vm229, %v2784, 0
  %v2877 = vsel %vm229, %v2785, 0
  %v2880 = vsel %vm229, %v2786, 0
  %v2883 = vsel %vm229, %v2787, 0
  %v2886 = vsel %vm229, %v2788, 0
  %v2889 = vsel %vm229, %v2789, 0
  %v2892 = vsel %vm229, %v2790, 0
  %v2895 = vsel %vm229, %v2791, 0
  %v2898 = vsel %vm229, %v2792, 0
  %v2901 = vsel %vm229, %v2793, 0
  %v2904 = vsel %vm229, %v2794, 0
  %v2907 = vsel %vm229, %v2795, 0
  %2909 = vmatprep.subr.bf16.mxu0 0
  %2910 = vmatpush1.bf16.msra.mxu0 %v2809
  %2911 = vmatprep.subr.bf16.mxu0 0
  %2912 = vmatpush1.bf16.msra.mxu0 %v2810
  %2913 = vmatprep.subr.bf16.mxu0 0
  %2914 = vmatpush1.bf16.msra.mxu0 0
  %2915 = vmatprep.subr.bf16.mxu0 0
  %2916 = vmatpush1.bf16.msra.mxu0 0
  %2917 = vmatprep.subr.bf16.mxu0 0
  %2918 = vmatpush1.bf16.msra.mxu0 0
  %2919 = vmatprep.subr.bf16.mxu0 0
  %2920 = vmatpush1.bf16.msra.mxu0 0
  %2921 = vmatprep.subr.bf16.mxu0 0
  %2922 = vmatpush1.bf16.msra.mxu0 0
  %2923 = vmatprep.subr.bf16.mxu0 0
  %2924 = vmatpush1.bf16.msra.mxu0 0
  %2925 = vmatprep.subr.bf16.mxu0 0
  %2926 = vmatpush1.bf16.msra.mxu0 0
  %2927 = vmatprep.subr.bf16.mxu0 0
  %2928 = vmatpush1.bf16.msra.mxu0 0
  %2929 = vmatprep.subr.bf16.mxu0 0
  %2930 = vmatpush1.bf16.msra.mxu0 0
  %2931 = vmatprep.subr.bf16.mxu0 0
  %2932 = vmatpush1.bf16.msra.mxu0 0
  %2933 = vmatprep.subr.bf16.mxu0 0
  %2934 = vmatpush1.bf16.msra.mxu0 0
  %2935 = vmatprep.subr.bf16.mxu0 0
  %2936 = vmatpush1.bf16.msra.mxu0 0
  %2937 = vmatprep.subr.bf16.mxu0 0
  %2938 = vmatpush1.bf16.msra.mxu0 0
  %2939 = vmatprep.subr.bf16.mxu0 0
  %2940 = vmatpush1.bf16.msra.mxu0 0
  %2941 = vmatprep.mubr.bf16.mxu0 0
  %2942 = vmatmul.mubr.bf16.gmra.mrb[0].mxu0 %v2814
  %v2943 = vpop.f32.mrb[0].mxu0
  %v2944 = vadd.f32 0.0, %v2943
  %v2945 = vpop.f32.mrb[0].mxu0
  %v2946 = vpop.f32.mrb[0].mxu0
  %v2947 = vadd.f32 0.0, %v2946
  %v2948 = vpop.f32.mrb[0].mxu0
  %2949 = vmatprep.mubr.bf16.mxu0 0
  %2950 = vmatmul.mubr.bf16.gmra.mrb[0].mxu0 %v2817
  %v2951 = vpop.f32.mrb[0].mxu0
  %v2952 = vadd.f32 0.0, %v2951
  %v2953 = vpop.f32.mrb[0].mxu0
  %v2954 = vpop.f32.mrb[0].mxu0
  %v2955 = vadd.f32 0.0, %v2954
  %v2956 = vpop.f32.mrb[0].mxu0
  %2957 = vmatprep.mubr.bf16.mxu0 0
  %2958 = vmatmul.mubr.bf16.gmra.mrb[0].mxu0 %v2820
  %v2959 = vpop.f32.mrb[0].mxu0
  %v2960 = vadd.f32 0.0, %v2959
  %v2961 = vpop.f32.mrb[0].mxu0
  %v2962 = vpop.f32.mrb[0].mxu0
  %v2963 = vadd.f32 0.0, %v2962
  %v2964 = vpop.f32.mrb[0].mxu0
  %2965 = vmatprep.mubr.bf16.mxu0 0
  %2966 = vmatmul.mubr.bf16.gmra.mrb[0].mxu0 %v2823
  %v2967 = vpop.f32.mrb[0].mxu0
  %v2968 = vadd.f32 0.0, %v2967
  %v2969 = vpop.f32.mrb[0].mxu0
  %v2970 = vpop.f32.mrb[0].mxu0
  %v2971 = vadd.f32 0.0, %v2970
  %v2972 = vpop.f32.mrb[0].mxu0
  %2973 = vmatprep.mubr.bf16.mxu0 0
  %2974 = vmatmul.mubr.bf16.gmra.mrb[0].mxu0 %v2826
  %v2975 = vpop.f32.mrb[0].mxu0
  %v2976 = vadd.f32 0.0, %v2975
  %v2977 = vpop.f32.mrb[0].mxu0
  %v2978 = vpop.f32.mrb[0].mxu0
  %v2979 = vadd.f32 0.0, %v2978
  %v2980 = vpop.f32.mrb[0].mxu0
  %2981 = vmatprep.mubr.bf16.mxu0 0
  %2982 = vmatmul.mubr.bf16.gmra.mrb[0].mxu0 %v2829
  %v2983 = vpop.f32.mrb[0].mxu0
  %v2984 = vadd.f32 0.0, %v2983
  %v2985 = vpop.f32.mrb[0].mxu0
  %v2986 = vpop.f32.mrb[0].mxu0
  %v2987 = vadd.f32 0.0, %v2986
  %v2988 = vpop.f32.mrb[0].mxu0
  %2989 = vmatprep.mubr.bf16.mxu0 0
  %2990 = vmatmul.mubr.bf16.gmra.mrb[0].mxu0 %v2832
  %v2991 = vpop.f32.mrb[0].mxu0
  %v2992 = vadd.f32 0.0, %v2991
  %v2993 = vpop.f32.mrb[0].mxu0
  %v2994 = vpop.f32.mrb[0].mxu0
  %v2995 = vadd.f32 0.0, %v2994
  %v2996 = vpop.f32.mrb[0].mxu0
  %2997 = vmatprep.mubr.bf16.mxu0 0
  %2998 = vmatmul.mubr.bf16.gmra.mrb[0].mxu0 %v2835
  %v2999 = vpop.f32.mrb[0].mxu0
  %v3000 = vadd.f32 0.0, %v2999
  %v3001 = vpop.f32.mrb[0].mxu0
  %v3002 = vpop.f32.mrb[0].mxu0
  %v3003 = vadd.f32 0.0, %v3002
  %v3004 = vpop.f32.mrb[0].mxu0
  %3005 = vmatprep.mubr.bf16.mxu0 0
  %3006 = vmatmul.mubr.bf16.gmra.mrb[0].mxu0 %v2838
  %v3007 = vpop.f32.mrb[0].mxu0
  %v3008 = vadd.f32 0.0, %v3007
  %v3009 = vpop.f32.mrb[0].mxu0
  %v3010 = vpop.f32.mrb[0].mxu0
  %v3011 = vadd.f32 0.0, %v3010
  %v3012 = vpop.f32.mrb[0].mxu0
  %3013 = vmatprep.mubr.bf16.mxu0 0
  %3014 = vmatmul.mubr.bf16.gmra.mrb[0].mxu0 %v2841
  %v3015 = vpop.f32.mrb[0].mxu0
  %v3016 = vadd.f32 0.0, %v3015
  %v3017 = vpop.f32.mrb[0].mxu0
  %v3018 = vpop.f32.mrb[0].mxu0
  %v3019 = vadd.f32 0.0, %v3018
  %v3020 = vpop.f32.mrb[0].mxu0
  %3021 = vmatprep.mubr.bf16.mxu0 0
  %3022 = vmatmul.mubr.bf16.gmra.mrb[0].mxu0 %v2844
  %v3023 = vpop.f32.mrb[0].mxu0
  %v3024 = vadd.f32 0.0, %v3023
  %v3025 = vpop.f32.mrb[0].mxu0
  %v3026 = vpop.f32.mrb[0].mxu0
  %v3027 = vadd.f32 0.0, %v3026
  %v3028 = vpop.f32.mrb[0].mxu0
  %3029 = vmatprep.mubr.bf16.mxu0 0
  %3030 = vmatmul.mubr.bf16.gmra.mrb[0].mxu0 %v2847
  %v3031 = vpop.f32.mrb[0].mxu0
  %v3032 = vadd.f32 0.0, %v3031
  %v3033 = vpop.f32.mrb[0].mxu0
  %v3034 = vpop.f32.mrb[0].mxu0
  %v3035 = vadd.f32 0.0, %v3034
  %v3036 = vpop.f32.mrb[0].mxu0
  %3037 = vmatprep.mubr.bf16.mxu0 0
  %3038 = vmatmul.mubr.bf16.gmra.mrb[0].mxu0 %v2850
  %v3039 = vpop.f32.mrb[0].mxu0
  %v3040 = vadd.f32 0.0, %v3039
  %v3041 = vpop.f32.mrb[0].mxu0
  %v3042 = vpop.f32.mrb[0].mxu0
  %v3043 = vadd.f32 0.0, %v3042
  %v3044 = vpop.f32.mrb[0].mxu0
  %3045 = vmatprep.mubr.bf16.mxu0 0
  %3046 = vmatmul.mubr.bf16.gmra.mrb[0].mxu0 %v2853
  %v3047 = vpop.f32.mrb[0].mxu0
  %v3048 = vadd.f32 0.0, %v3047
  %v3049 = vpop.f32.mrb[0].mxu0
  %v3050 = vpop.f32.mrb[0].mxu0
  %v3051 = vadd.f32 0.0, %v3050
  %v3052 = vpop.f32.mrb[0].mxu0
  %3053 = vmatprep.mubr.bf16.mxu0 0
  %3054 = vmatmul.mubr.bf16.gmra.mrb[0].mxu0 %v2856
  %v3055 = vpop.f32.mrb[0].mxu0
  %v3056 = vadd.f32 0.0, %v3055
  %v3057 = vpop.f32.mrb[0].mxu0
  %v3058 = vpop.f32.mrb[0].mxu0
  %v3059 = vadd.f32 0.0, %v3058
  %v3060 = vpop.f32.mrb[0].mxu0
  %3061 = vmatprep.mubr.bf16.mxu0 0
  %3062 = vmatmul.mubr.bf16.gmra.mrb[0].mxu0 %v2859
  %v3063 = vpop.f32.mrb[0].mxu0
  %v3064 = vadd.f32 0.0, %v3063
  %v3065 = vpop.f32.mrb[0].mxu0
  %v3066 = vpop.f32.mrb[0].mxu0
  %v3067 = vadd.f32 0.0, %v3066
  %v3068 = vpop.f32.mrb[0].mxu0
  %3069 = vmatprep.mubr.bf16.mxu0 0
  %3070 = vmatmul.mubr.bf16.gmra.mrb[0].mxu0 %v2862
  %v3071 = vpop.f32.mrb[0].mxu0
  %v3072 = vadd.f32 0.0, %v3071
  %v3073 = vpop.f32.mrb[0].mxu0
  %v3074 = vpop.f32.mrb[0].mxu0
  %v3075 = vadd.f32 0.0, %v3074
  %v3076 = vpop.f32.mrb[0].mxu0
  %3077 = vmatprep.mubr.bf16.mxu0 0
  %3078 = vmatmul.mubr.bf16.gmra.mrb[0].mxu0 %v2865
  %v3079 = vpop.f32.mrb[0].mxu0
  %v3080 = vadd.f32 0.0, %v3079
  %v3081 = vpop.f32.mrb[0].mxu0
  %v3082 = vpop.f32.mrb[0].mxu0
  %v3083 = vadd.f32 0.0, %v3082
  %v3084 = vpop.f32.mrb[0].mxu0
  %3085 = vmatprep.mubr.bf16.mxu0 0
  %3086 = vmatmul.mubr.bf16.gmra.mrb[0].mxu0 %v2868
  %v3087 = vpop.f32.mrb[0].mxu0
  %v3088 = vadd.f32 0.0, %v3087
  %v3089 = vpop.f32.mrb[0].mxu0
  %v3090 = vpop.f32.mrb[0].mxu0
  %v3091 = vadd.f32 0.0, %v3090
  %v3092 = vpop.f32.mrb[0].mxu0
  %3093 = vmatprep.mubr.bf16.mxu0 0
  %3094 = vmatmul.mubr.bf16.gmra.mrb[0].mxu0 %v2871
  %v3095 = vpop.f32.mrb[0].mxu0
  %v3096 = vadd.f32 0.0, %v3095
  %v3097 = vpop.f32.mrb[0].mxu0
  %v3098 = vpop.f32.mrb[0].mxu0
  %v3099 = vadd.f32 0.0, %v3098
  %v3100 = vpop.f32.mrb[0].mxu0
  %3101 = vmatprep.mubr.bf16.mxu0 0
  %3102 = vmatmul.mubr.bf16.gmra.mrb[0].mxu0 %v2874
  %v3103 = vpop.f32.mrb[0].mxu0
  %v3104 = vadd.f32 0.0, %v3103
  %v3105 = vpop.f32.mrb[0].mxu0
  %v3106 = vpop.f32.mrb[0].mxu0
  %v3107 = vadd.f32 0.0, %v3106
  %v3108 = vpop.f32.mrb[0].mxu0
  %3109 = vmatprep.mubr.bf16.mxu0 0
  %3110 = vmatmul.mubr.bf16.gmra.mrb[0].mxu0 %v2877
  %v3111 = vpop.f32.mrb[0].mxu0
  %v3112 = vadd.f32 0.0, %v3111
  %v3113 = vpop.f32.mrb[0].mxu0
  %v3114 = vpop.f32.mrb[0].mxu0
  %v3115 = vadd.f32 0.0, %v3114
  %v3116 = vpop.f32.mrb[0].mxu0
  %3117 = vmatprep.mubr.bf16.mxu0 0
  %3118 = vmatmul.mubr.bf16.gmra.mrb[0].mxu0 %v2880
  %v3119 = vpop.f32.mrb[0].mxu0
  %v3120 = vadd.f32 0.0, %v3119
  %v3121 = vpop.f32.mrb[0].mxu0
  %v3122 = vpop.f32.mrb[0].mxu0
  %v3123 = vadd.f32 0.0, %v3122
  %v3124 = vpop.f32.mrb[0].mxu0
  %3125 = vmatprep.mubr.bf16.mxu0 0
  %3126 = vmatmul.mubr.bf16.gmra.mrb[0].mxu0 %v2883
  %v3127 = vpop.f32.mrb[0].mxu0
  %v3128 = vadd.f32 0.0, %v3127
  %v3129 = vpop.f32.mrb[0].mxu0
  %v3130 = vpop.f32.mrb[0].mxu0
  %v3131 = vadd.f32 0.0, %v3130
  %v3132 = vpop.f32.mrb[0].mxu0
  %3133 = vmatprep.mubr.bf16.mxu0 0
  %3134 = vmatmul.mubr.bf16.gmra.mrb[0].mxu0 %v2886
  %v3135 = vpop.f32.mrb[0].mxu0
  %v3136 = vadd.f32 0.0, %v3135
  %v3137 = vpop.f32.mrb[0].mxu0
  %v3138 = vpop.f32.mrb[0].mxu0
  %v3139 = vadd.f32 0.0, %v3138
  %v3140 = vpop.f32.mrb[0].mxu0
  %3141 = vmatprep.mubr.bf16.mxu0 0
  %3142 = vmatmul.mubr.bf16.gmra.mrb[0].mxu0 %v2889
  %v3143 = vpop.f32.mrb[0].mxu0
  %v3144 = vadd.f32 0.0, %v3143
  %v3145 = vpop.f32.mrb[0].mxu0
  %v3146 = vpop.f32.mrb[0].mxu0
  %v3147 = vadd.f32 0.0, %v3146
  %v3148 = vpop.f32.mrb[0].mxu0
  %3149 = vmatprep.mubr.bf16.mxu0 0
  %3150 = vmatmul.mubr.bf16.gmra.mrb[0].mxu0 %v2892
  %v3151 = vpop.f32.mrb[0].mxu0
  %v3152 = vadd.f32 0.0, %v3151
  %v3153 = vpop.f32.mrb[0].mxu0
  %v3154 = vpop.f32.mrb[0].mxu0
  %v3155 = vadd.f32 0.0, %v3154
  %v3156 = vpop.f32.mrb[0].mxu0
  %3157 = vmatprep.mubr.bf16.mxu0 0
  %3158 = vmatmul.mubr.bf16.gmra.mrb[0].mxu0 %v2895
  %v3159 = vpop.f32.mrb[0].mxu0
  %v3160 = vadd.f32 0.0, %v3159
  %v3161 = vpop.f32.mrb[0].mxu0
  %v3162 = vpop.f32.mrb[0].mxu0
  %v3163 = vadd.f32 0.0, %v3162
  %v3164 = vpop.f32.mrb[0].mxu0
  %3165 = vmatprep.mubr.bf16.mxu0 0
  %3166 = vmatmul.mubr.bf16.gmra.mrb[0].mxu0 %v2898
  %v3167 = vpop.f32.mrb[0].mxu0
  %v3168 = vadd.f32 0.0, %v3167
  %v3169 = vpop.f32.mrb[0].mxu0
  %v3170 = vpop.f32.mrb[0].mxu0
  %v3171 = vadd.f32 0.0, %v3170
  %v3172 = vpop.f32.mrb[0].mxu0
  %3173 = vmatprep.mubr.bf16.mxu0 0
  %3174 = vmatmul.mubr.bf16.gmra.mrb[0].mxu0 %v2901
  %v3175 = vpop.f32.mrb[0].mxu0
  %v3176 = vadd.f32 0.0, %v3175
  %v3177 = vpop.f32.mrb[0].mxu0
  %v3178 = vpop.f32.mrb[0].mxu0
  %v3179 = vadd.f32 0.0, %v3178
  %v3180 = vpop.f32.mrb[0].mxu0
  %3181 = vmatprep.mubr.bf16.mxu0 0
  %3182 = vmatmul.mubr.bf16.gmra.mrb[0].mxu0 %v2904
  %v3183 = vpop.f32.mrb[0].mxu0
  %v3184 = vadd.f32 0.0, %v3183
  %v3185 = vpop.f32.mrb[0].mxu0
  %v3186 = vpop.f32.mrb[0].mxu0
  %v3187 = vadd.f32 0.0, %v3186
  %v3188 = vpop.f32.mrb[0].mxu0
  %3189 = vmatprep.mubr.bf16.mxu0 0
  %3190 = vmatmul.mubr.bf16.gmra.mrb[0].mxu0 %v2907
  %v3191 = vpop.f32.mrb[0].mxu0
  %v3192 = vadd.f32 0.0, %v3191
  %v3193 = vpop.f32.mrb[0].mxu0
  %v3194 = vpop.f32.mrb[0].mxu0
  %v3195 = vadd.f32 0.0, %v3194
  %v3196 = vpop.f32.mrb[0].mxu0
  %3197 = vdwg.mxu0
  %v3198 = vadd.f32 %v2636, %v2944
  %v3199 = vadd.f32 %v2637, %v2947
  %v3200 = vadd.f32 %v2638, %v2952
  %v3201 = vadd.f32 %v2639, %v2955
  %v3202 = vadd.f32 %v2640, %v2960
  %v3203 = vadd.f32 %v2641, %v2963
  %v3204 = vadd.f32 %v2642, %v2968
  %v3205 = vadd.f32 %v2643, %v2971
  %v3206 = vadd.f32 %v2644, %v2976
  %v3207 = vadd.f32 %v2645, %v2979
  %v3208 = vadd.f32 %v2646, %v2984
  %v3209 = vadd.f32 %v2647, %v2987
  %v3210 = vadd.f32 %v2648, %v2992
  %v3211 = vadd.f32 %v2649, %v2995
  %v3212 = vadd.f32 %v2650, %v3000
  %v3213 = vadd.f32 %v2651, %v3003
  %v3214 = vadd.f32 %v2652, %v3008
  %v3215 = vadd.f32 %v2653, %v3011
  %v3216 = vadd.f32 %v2654, %v3016
  %v3217 = vadd.f32 %v2655, %v3019
  %v3218 = vadd.f32 %v2656, %v3024
  %v3219 = vadd.f32 %v2657, %v3027
  %v3220 = vadd.f32 %v2658, %v3032
  %v3221 = vadd.f32 %v2659, %v3035
  %v3222 = vadd.f32 %v2660, %v3040
  %v3223 = vadd.f32 %v2661, %v3043
  %v3224 = vadd.f32 %v2662, %v3048
  %v3225 = vadd.f32 %v2663, %v3051
  %v3226 = vadd.f32 %v2664, %v3056
  %v3227 = vadd.f32 %v2665, %v3059
  %v3228 = vadd.f32 %v2666, %v3064
  %v3229 = vadd.f32 %v2667, %v3067
  %v3230 = vadd.f32 %v2668, %v3072
  %v3231 = vadd.f32 %v2669, %v3075
  %v3232 = vadd.f32 %v2670, %v3080
  %v3233 = vadd.f32 %v2671, %v3083
  %v3234 = vadd.f32 %v2672, %v3088
  %v3235 = vadd.f32 %v2673, %v3091
  %v3236 = vadd.f32 %v2674, %v3096
  %v3237 = vadd.f32 %v2675, %v3099
  %v3238 = vadd.f32 %v2676, %v3104
  %v3239 = vadd.f32 %v2677, %v3107
  %v3240 = vadd.f32 %v2678, %v3112
  %v3241 = vadd.f32 %v2679, %v3115
  %v3242 = vadd.f32 %v2680, %v3120
  %v3243 = vadd.f32 %v2681, %v3123
  %v3244 = vadd.f32 %v2682, %v3128
  %v3245 = vadd.f32 %v2683, %v3131
  %v3246 = vadd.f32 %v2684, %v3136
  %v3247 = vadd.f32 %v2685, %v3139
  %v3248 = vadd.f32 %v2686, %v3144
  %v3249 = vadd.f32 %v2687, %v3147
  %v3250 = vadd.f32 %v2688, %v3152
  %v3251 = vadd.f32 %v2689, %v3155
  %v3252 = vadd.f32 %v2690, %v3160
  %v3253 = vadd.f32 %v2691, %v3163
  %v3254 = vadd.f32 %v2692, %v3168
  %v3255 = vadd.f32 %v2693, %v3171
  %v3256 = vadd.f32 %v2694, %v3176
  %v3257 = vadd.f32 %v2695, %v3179
  %v3258 = vadd.f32 %v2696, %v3184
  %v3259 = vadd.f32 %v2697, %v3187
  %v3260 = vadd.f32 %v2698, %v3192
  %v3261 = vadd.f32 %v2699, %v3195
  %s3262 = scalar_lea.vmem %s0, 24
  %v3263 = vld [vmem:[%s3262] sm:$0xff]
  %v3264 = vld [vmem:[%s3262 + $0x8] sm:$0xff]
  %v3265 = vld [vmem:[%s3262 + $0x18] sm:$0xff]
  %v3266 = vld [vmem:[%s3262 + $0x20] sm:$0xff]
  %v3267 = vld [vmem:[%s3262 + $0x30] sm:$0xff]
  %v3268 = vld [vmem:[%s3262 + $0x38] sm:$0xff]
  %v3269 = vld [vmem:[%s3262 + $0x48] sm:$0xff]
  %v3270 = vld [vmem:[%s3262 + $0x50] sm:$0xff]
  %v3271 = vld [vmem:[%s3262 + $0x60] sm:$0xff]
  %v3272 = vld [vmem:[%s3262 + $0x68] sm:$0xff]
  %v3273 = vld [vmem:[%s3262 + $0x78] sm:$0xff]
  %v3274 = vld [vmem:[%s3262 + $0x80] sm:$0xff]
  %v3275 = vld [vmem:[%s3262 + $0x90] sm:$0xff]
  %v3276 = vld [vmem:[%s3262 + $0x98] sm:$0xff]
  %v3277 = vld [vmem:[%s3262 + $0xa8] sm:$0xff]
  %v3278 = vld [vmem:[%s3262 + $0xb0] sm:$0xff]
  %v3279 = vld [vmem:[%s3262 + $0xc0] sm:$0xff]
  %v3280 = vld [vmem:[%s3262 + $0xc8] sm:$0xff]
  %v3281 = vld [vmem:[%s3262 + $0xd8] sm:$0xff]
  %v3282 = vld [vmem:[%s3262 + $0xe0] sm:$0xff]
  %v3283 = vld [vmem:[%s3262 + $0xf0] sm:$0xff]
  %v3284 = vld [vmem:[%s3262 + $0xf8] sm:$0xff]
  %v3285 = vld [vmem:[%s3262 + $0x108] sm:$0xff]
  %v3286 = vld [vmem:[%s3262 + $0x110] sm:$0xff]
  %v3287 = vld [vmem:[%s3262 + $0x120] sm:$0xff]
  %v3288 = vld [vmem:[%s3262 + $0x128] sm:$0xff]
  %v3289 = vld [vmem:[%s3262 + $0x138] sm:$0xff]
  %v3290 = vld [vmem:[%s3262 + $0x140] sm:$0xff]
  %v3291 = vld [vmem:[%s3262 + $0x150] sm:$0xff]
  %v3292 = vld [vmem:[%s3262 + $0x158] sm:$0xff]
  %v3293 = vld [vmem:[%s3262 + $0x168] sm:$0xff]
  %v3294 = vld [vmem:[%s3262 + $0x170] sm:$0xff]
  %v3295 = vld [vmem:[%s3262 + $0x198] sm:$0xff]
  %v3296 = vld [vmem:[%s3262 + $0x1a0] sm:$0xff]
  %v3297 = vld [vmem:[%s3262 + $0x1b0] sm:$0xff]
  %v3298 = vld [vmem:[%s3262 + $0x1b8] sm:$0xff]
  %v3299 = vld [vmem:[%s3262 + $0x1c8] sm:$0xff]
  %v3300 = vld [vmem:[%s3262 + $0x1d0] sm:$0xff]
  %v3301 = vld [vmem:[%s3262 + $0x1e0] sm:$0xff]
  %v3302 = vld [vmem:[%s3262 + $0x1e8] sm:$0xff]
  %v3303 = vld [vmem:[%s3262 + $0x1f8] sm:$0xff]
  %v3304 = vld [vmem:[%s3262 + $0x200] sm:$0xff]
  %v3305 = vld [vmem:[%s3262 + $0x210] sm:$0xff]
  %v3306 = vld [vmem:[%s3262 + $0x218] sm:$0xff]
  %v3307 = vld [vmem:[%s3262 + $0x228] sm:$0xff]
  %v3308 = vld [vmem:[%s3262 + $0x230] sm:$0xff]
  %v3309 = vld [vmem:[%s3262 + $0x240] sm:$0xff]
  %v3310 = vld [vmem:[%s3262 + $0x248] sm:$0xff]
  %v3311 = vld [vmem:[%s3262 + $0x258] sm:$0xff]
  %v3312 = vld [vmem:[%s3262 + $0x260] sm:$0xff]
  %v3313 = vld [vmem:[%s3262 + $0x270] sm:$0xff]
  %v3314 = vld [vmem:[%s3262 + $0x278] sm:$0xff]
  %v3315 = vld [vmem:[%s3262 + $0x288] sm:$0xff]
  %v3316 = vld [vmem:[%s3262 + $0x290] sm:$0xff]
  %v3317 = vld [vmem:[%s3262 + $0x2a0] sm:$0xff]
  %v3318 = vld [vmem:[%s3262 + $0x2a8] sm:$0xff]
  %v3319 = vld [vmem:[%s3262 + $0x2b8] sm:$0xff]
  %v3320 = vld [vmem:[%s3262 + $0x2c0] sm:$0xff]
  %v3321 = vld [vmem:[%s3262 + $0x2d0] sm:$0xff]
  %v3322 = vld [vmem:[%s3262 + $0x2d8] sm:$0xff]
  %v3323 = vld [vmem:[%s3262 + $0x2e8] sm:$0xff]
  %v3324 = vld [vmem:[%s3262 + $0x2f0] sm:$0xff]
  %v3325 = vld [vmem:[%s3262 + $0x300] sm:$0xff]
  %v3326 = vld [vmem:[%s3262 + $0x308] sm:$0xff]
  %v3327 = vpack.c.bf16 %v3264, %v3263
  %v3328 = vpack.c.bf16 %v3266, %v3265
  %v3329 = vpack.c.bf16 %v3268, %v3267
  %v3330 = vpack.c.bf16 %v3270, %v3269
  %v3331 = vpack.c.bf16 %v3272, %v3271
  %v3332 = vpack.c.bf16 %v3274, %v3273
  %v3333 = vpack.c.bf16 %v3276, %v3275
  %v3334 = vpack.c.bf16 %v3278, %v3277
  %v3335 = vpack.c.bf16 %v3280, %v3279
  %v3336 = vpack.c.bf16 %v3282, %v3281
  %v3337 = vpack.c.bf16 %v3284, %v3283
  %v3338 = vpack.c.bf16 %v3286, %v3285
  %v3339 = vpack.c.bf16 %v3288, %v3287
  %v3340 = vpack.c.bf16 %v3290, %v3289
  %v3341 = vpack.c.bf16 %v3292, %v3291
  %v3342 = vpack.c.bf16 %v3294, %v3293
  %v3343 = vpack.c.bf16 %v3296, %v3295
  %v3344 = vpack.c.bf16 %v3298, %v3297
  %v3345 = vpack.c.bf16 %v3300, %v3299
  %v3346 = vpack.c.bf16 %v3302, %v3301
  %v3347 = vpack.c.bf16 %v3304, %v3303
  %v3348 = vpack.c.bf16 %v3306, %v3305
  %v3349 = vpack.c.bf16 %v3308, %v3307
  %v3350 = vpack.c.bf16 %v3310, %v3309
  %v3351 = vpack.c.bf16 %v3312, %v3311
  %v3352 = vpack.c.bf16 %v3314, %v3313
  %v3353 = vpack.c.bf16 %v3316, %v3315
  %v3354 = vpack.c.bf16 %v3318, %v3317
  %v3355 = vpack.c.bf16 %v3320, %v3319
  %v3356 = vpack.c.bf16 %v3322, %v3321
  %v3357 = vpack.c.bf16 %v3324, %v3323
  %v3358 = vpack.c.bf16 %v3326, %v3325
  %s3359 = scalar_lea.vmem %s1, 96
  %v3360 = vld [vmem:[%s3359] sm:$0xf]
  %v3361 = vld [vmem:[%s3359 + $0x4] sm:$0xf]
  %v3362 = vld [vmem:[%s3359 + $0x8] sm:$0xf]
  %v3363 = vld [vmem:[%s3359 + $0xc] sm:$0xf]
  %v3368 = vunpack.c.l.b16 %v3360
  %v3369 = vunpack.c.l.b16 %v3361
  %v3370 = vunpack.c.l.b16 %v3362
  %v3371 = vunpack.c.l.b16 %v3363
  %v3372 = vpack.c.b16 %v3369, %v3368
  %v3373 = vpack.c.b16 %v3371, %v3370
  %v3377 = vsel %vm229, %v3327, 0
  %v3380 = vsel %vm229, %v3328, 0
  %v3383 = vsel %vm229, %v3329, 0
  %v3386 = vsel %vm229, %v3330, 0
  %v3389 = vsel %vm229, %v3331, 0
  %v3392 = vsel %vm229, %v3332, 0
  %v3395 = vsel %vm229, %v3333, 0
  %v3398 = vsel %vm229, %v3334, 0
  %v3401 = vsel %vm229, %v3335, 0
  %v3404 = vsel %vm229, %v3336, 0
  %v3407 = vsel %vm229, %v3337, 0
  %v3410 = vsel %vm229, %v3338, 0
  %v3413 = vsel %vm229, %v3339, 0
  %v3416 = vsel %vm229, %v3340, 0
  %v3419 = vsel %vm229, %v3341, 0
  %v3422 = vsel %vm229, %v3342, 0
  %v3425 = vsel %vm229, %v3343, 0
  %v3428 = vsel %vm229, %v3344, 0
  %v3431 = vsel %vm229, %v3345, 0
  %v3434 = vsel %vm229, %v3346, 0
  %v3437 = vsel %vm229, %v3347, 0
  %v3440 = vsel %vm229, %v3348, 0
  %v3443 = vsel %vm229, %v3349, 0
  %v3446 = vsel %vm229, %v3350, 0
  %v3449 = vsel %vm229, %v3351, 0
  %v3452 = vsel %vm229, %v3352, 0
  %v3455 = vsel %vm229, %v3353, 0
  %v3458 = vsel %vm229, %v3354, 0
  %v3461 = vsel %vm229, %v3355, 0
  %v3464 = vsel %vm229, %v3356, 0
  %v3467 = vsel %vm229, %v3357, 0
  %v3470 = vsel %vm229, %v3358, 0
  %3472 = vmatprep.subr.bf16.mxu0 0
  %3473 = vmatpush1.bf16.msra.mxu0 %v3372
  %3474 = vmatprep.subr.bf16.mxu0 0
  %3475 = vmatpush1.bf16.msra.mxu0 %v3373
  %3476 = vmatprep.subr.bf16.mxu0 0
  %3477 = vmatpush1.bf16.msra.mxu0 0
  %3478 = vmatprep.subr.bf16.mxu0 0
  %3479 = vmatpush1.bf16.msra.mxu0 0
  %3480 = vmatprep.subr.bf16.mxu0 0
  %3481 = vmatpush1.bf16.msra.mxu0 0
  %3482 = vmatprep.subr.bf16.mxu0 0
  %3483 = vmatpush1.bf16.msra.mxu0 0
  %3484 = vmatprep.subr.bf16.mxu0 0
  %3485 = vmatpush1.bf16.msra.mxu0 0
  %3486 = vmatprep.subr.bf16.mxu0 0
  %3487 = vmatpush1.bf16.msra.mxu0 0
  %3488 = vmatprep.subr.bf16.mxu0 0
  %3489 = vmatpush1.bf16.msra.mxu0 0
  %3490 = vmatprep.subr.bf16.mxu0 0
  %3491 = vmatpush1.bf16.msra.mxu0 0
  %3492 = vmatprep.subr.bf16.mxu0 0
  %3493 = vmatpush1.bf16.msra.mxu0 0
  %3494 = vmatprep.subr.bf16.mxu0 0
  %3495 = vmatpush1.bf16.msra.mxu0 0
  %3496 = vmatprep.subr.bf16.mxu0 0
  %3497 = vmatpush1.bf16.msra.mxu0 0
  %3498 = vmatprep.subr.bf16.mxu0 0
  %3499 = vmatpush1.bf16.msra.mxu0 0
  %3500 = vmatprep.subr.bf16.mxu0 0
  %3501 = vmatpush1.bf16.msra.mxu0 0
  %3502 = vmatprep.subr.bf16.mxu0 0
  %3503 = vmatpush1.bf16.msra.mxu0 0
  %3504 = vmatprep.mubr.bf16.mxu0 0
  %3505 = vmatmul.mubr.bf16.gmra.mrb[0].mxu0 %v3377
  %v3506 = vpop.f32.mrb[0].mxu0
  %v3507 = vadd.f32 0.0, %v3506
  %v3508 = vpop.f32.mrb[0].mxu0
  %v3509 = vpop.f32.mrb[0].mxu0
  %v3510 = vadd.f32 0.0, %v3509
  %v3511 = vpop.f32.mrb[0].mxu0
  %3512 = vmatprep.mubr.bf16.mxu0 0
  %3513 = vmatmul.mubr.bf16.gmra.mrb[0].mxu0 %v3380
  %v3514 = vpop.f32.mrb[0].mxu0
  %v3515 = vadd.f32 0.0, %v3514
  %v3516 = vpop.f32.mrb[0].mxu0
  %v3517 = vpop.f32.mrb[0].mxu0
  %v3518 = vadd.f32 0.0, %v3517
  %v3519 = vpop.f32.mrb[0].mxu0
  %3520 = vmatprep.mubr.bf16.mxu0 0
  %3521 = vmatmul.mubr.bf16.gmra.mrb[0].mxu0 %v3383
  %v3522 = vpop.f32.mrb[0].mxu0
  %v3523 = vadd.f32 0.0, %v3522
  %v3524 = vpop.f32.mrb[0].mxu0
  %v3525 = vpop.f32.mrb[0].mxu0
  %v3526 = vadd.f32 0.0, %v3525
  %v3527 = vpop.f32.mrb[0].mxu0
  %3528 = vmatprep.mubr.bf16.mxu0 0
  %3529 = vmatmul.mubr.bf16.gmra.mrb[0].mxu0 %v3386
  %v3530 = vpop.f32.mrb[0].mxu0
  %v3531 = vadd.f32 0.0, %v3530
  %v3532 = vpop.f32.mrb[0].mxu0
  %v3533 = vpop.f32.mrb[0].mxu0
  %v3534 = vadd.f32 0.0, %v3533
  %v3535 = vpop.f32.mrb[0].mxu0
  %3536 = vmatprep.mubr.bf16.mxu0 0
  %3537 = vmatmul.mubr.bf16.gmra.mrb[0].mxu0 %v3389
  %v3538 = vpop.f32.mrb[0].mxu0
  %v3539 = vadd.f32 0.0, %v3538
  %v3540 = vpop.f32.mrb[0].mxu0
  %v3541 = vpop.f32.mrb[0].mxu0
  %v3542 = vadd.f32 0.0, %v3541
  %v3543 = vpop.f32.mrb[0].mxu0
  %3544 = vmatprep.mubr.bf16.mxu0 0
  %3545 = vmatmul.mubr.bf16.gmra.mrb[0].mxu0 %v3392
  %v3546 = vpop.f32.mrb[0].mxu0
  %v3547 = vadd.f32 0.0, %v3546
  %v3548 = vpop.f32.mrb[0].mxu0
  %v3549 = vpop.f32.mrb[0].mxu0
  %v3550 = vadd.f32 0.0, %v3549
  %v3551 = vpop.f32.mrb[0].mxu0
  %3552 = vmatprep.mubr.bf16.mxu0 0
  %3553 = vmatmul.mubr.bf16.gmra.mrb[0].mxu0 %v3395
  %v3554 = vpop.f32.mrb[0].mxu0
  %v3555 = vadd.f32 0.0, %v3554
  %v3556 = vpop.f32.mrb[0].mxu0
  %v3557 = vpop.f32.mrb[0].mxu0
  %v3558 = vadd.f32 0.0, %v3557
  %v3559 = vpop.f32.mrb[0].mxu0
  %3560 = vmatprep.mubr.bf16.mxu0 0
  %3561 = vmatmul.mubr.bf16.gmra.mrb[0].mxu0 %v3398
  %v3562 = vpop.f32.mrb[0].mxu0
  %v3563 = vadd.f32 0.0, %v3562
  %v3564 = vpop.f32.mrb[0].mxu0
  %v3565 = vpop.f32.mrb[0].mxu0
  %v3566 = vadd.f32 0.0, %v3565
  %v3567 = vpop.f32.mrb[0].mxu0
  %3568 = vmatprep.mubr.bf16.mxu0 0
  %3569 = vmatmul.mubr.bf16.gmra.mrb[0].mxu0 %v3401
  %v3570 = vpop.f32.mrb[0].mxu0
  %v3571 = vadd.f32 0.0, %v3570
  %v3572 = vpop.f32.mrb[0].mxu0
  %v3573 = vpop.f32.mrb[0].mxu0
  %v3574 = vadd.f32 0.0, %v3573
  %v3575 = vpop.f32.mrb[0].mxu0
  %3576 = vmatprep.mubr.bf16.mxu0 0
  %3577 = vmatmul.mubr.bf16.gmra.mrb[0].mxu0 %v3404
  %v3578 = vpop.f32.mrb[0].mxu0
  %v3579 = vadd.f32 0.0, %v3578
  %v3580 = vpop.f32.mrb[0].mxu0
  %v3581 = vpop.f32.mrb[0].mxu0
  %v3582 = vadd.f32 0.0, %v3581
  %v3583 = vpop.f32.mrb[0].mxu0
  %3584 = vmatprep.mubr.bf16.mxu0 0
  %3585 = vmatmul.mubr.bf16.gmra.mrb[0].mxu0 %v3407
  %v3586 = vpop.f32.mrb[0].mxu0
  %v3587 = vadd.f32 0.0, %v3586
  %v3588 = vpop.f32.mrb[0].mxu0
  %v3589 = vpop.f32.mrb[0].mxu0
  %v3590 = vadd.f32 0.0, %v3589
  %v3591 = vpop.f32.mrb[0].mxu0
  %3592 = vmatprep.mubr.bf16.mxu0 0
  %3593 = vmatmul.mubr.bf16.gmra.mrb[0].mxu0 %v3410
  %v3594 = vpop.f32.mrb[0].mxu0
  %v3595 = vadd.f32 0.0, %v3594
  %v3596 = vpop.f32.mrb[0].mxu0
  %v3597 = vpop.f32.mrb[0].mxu0
  %v3598 = vadd.f32 0.0, %v3597
  %v3599 = vpop.f32.mrb[0].mxu0
  %3600 = vmatprep.mubr.bf16.mxu0 0
  %3601 = vmatmul.mubr.bf16.gmra.mrb[0].mxu0 %v3413
  %v3602 = vpop.f32.mrb[0].mxu0
  %v3603 = vadd.f32 0.0, %v3602
  %v3604 = vpop.f32.mrb[0].mxu0
  %v3605 = vpop.f32.mrb[0].mxu0
  %v3606 = vadd.f32 0.0, %v3605
  %v3607 = vpop.f32.mrb[0].mxu0
  %3608 = vmatprep.mubr.bf16.mxu0 0
  %3609 = vmatmul.mubr.bf16.gmra.mrb[0].mxu0 %v3416
  %v3610 = vpop.f32.mrb[0].mxu0
  %v3611 = vadd.f32 0.0, %v3610
  %v3612 = vpop.f32.mrb[0].mxu0
  %v3613 = vpop.f32.mrb[0].mxu0
  %v3614 = vadd.f32 0.0, %v3613
  %v3615 = vpop.f32.mrb[0].mxu0
  %3616 = vmatprep.mubr.bf16.mxu0 0
  %3617 = vmatmul.mubr.bf16.gmra.mrb[0].mxu0 %v3419
  %v3618 = vpop.f32.mrb[0].mxu0
  %v3619 = vadd.f32 0.0, %v3618
  %v3620 = vpop.f32.mrb[0].mxu0
  %v3621 = vpop.f32.mrb[0].mxu0
  %v3622 = vadd.f32 0.0, %v3621
  %v3623 = vpop.f32.mrb[0].mxu0
  %3624 = vmatprep.mubr.bf16.mxu0 0
  %3625 = vmatmul.mubr.bf16.gmra.mrb[0].mxu0 %v3422
  %v3626 = vpop.f32.mrb[0].mxu0
  %v3627 = vadd.f32 0.0, %v3626
  %v3628 = vpop.f32.mrb[0].mxu0
  %v3629 = vpop.f32.mrb[0].mxu0
  %v3630 = vadd.f32 0.0, %v3629
  %v3631 = vpop.f32.mrb[0].mxu0
  %3632 = vmatprep.mubr.bf16.mxu0 0
  %3633 = vmatmul.mubr.bf16.gmra.mrb[0].mxu0 %v3425
  %v3634 = vpop.f32.mrb[0].mxu0
  %v3635 = vadd.f32 0.0, %v3634
  %v3636 = vpop.f32.mrb[0].mxu0
  %v3637 = vpop.f32.mrb[0].mxu0
  %v3638 = vadd.f32 0.0, %v3637
  %v3639 = vpop.f32.mrb[0].mxu0
  %3640 = vmatprep.mubr.bf16.mxu0 0
  %3641 = vmatmul.mubr.bf16.gmra.mrb[0].mxu0 %v3428
  %v3642 = vpop.f32.mrb[0].mxu0
  %v3643 = vadd.f32 0.0, %v3642
  %v3644 = vpop.f32.mrb[0].mxu0
  %v3645 = vpop.f32.mrb[0].mxu0
  %v3646 = vadd.f32 0.0, %v3645
  %v3647 = vpop.f32.mrb[0].mxu0
  %3648 = vmatprep.mubr.bf16.mxu0 0
  %3649 = vmatmul.mubr.bf16.gmra.mrb[0].mxu0 %v3431
  %v3650 = vpop.f32.mrb[0].mxu0
  %v3651 = vadd.f32 0.0, %v3650
  %v3652 = vpop.f32.mrb[0].mxu0
  %v3653 = vpop.f32.mrb[0].mxu0
  %v3654 = vadd.f32 0.0, %v3653
  %v3655 = vpop.f32.mrb[0].mxu0
  %3656 = vmatprep.mubr.bf16.mxu0 0
  %3657 = vmatmul.mubr.bf16.gmra.mrb[0].mxu0 %v3434
  %v3658 = vpop.f32.mrb[0].mxu0
  %v3659 = vadd.f32 0.0, %v3658
  %v3660 = vpop.f32.mrb[0].mxu0
  %v3661 = vpop.f32.mrb[0].mxu0
  %v3662 = vadd.f32 0.0, %v3661
  %v3663 = vpop.f32.mrb[0].mxu0
  %3664 = vmatprep.mubr.bf16.mxu0 0
  %3665 = vmatmul.mubr.bf16.gmra.mrb[0].mxu0 %v3437
  %v3666 = vpop.f32.mrb[0].mxu0
  %v3667 = vadd.f32 0.0, %v3666
  %v3668 = vpop.f32.mrb[0].mxu0
  %v3669 = vpop.f32.mrb[0].mxu0
  %v3670 = vadd.f32 0.0, %v3669
  %v3671 = vpop.f32.mrb[0].mxu0
  %3672 = vmatprep.mubr.bf16.mxu0 0
  %3673 = vmatmul.mubr.bf16.gmra.mrb[0].mxu0 %v3440
  %v3674 = vpop.f32.mrb[0].mxu0
  %v3675 = vadd.f32 0.0, %v3674
  %v3676 = vpop.f32.mrb[0].mxu0
  %v3677 = vpop.f32.mrb[0].mxu0
  %v3678 = vadd.f32 0.0, %v3677
  %v3679 = vpop.f32.mrb[0].mxu0
  %3680 = vmatprep.mubr.bf16.mxu0 0
  %3681 = vmatmul.mubr.bf16.gmra.mrb[0].mxu0 %v3443
  %v3682 = vpop.f32.mrb[0].mxu0
  %v3683 = vadd.f32 0.0, %v3682
  %v3684 = vpop.f32.mrb[0].mxu0
  %v3685 = vpop.f32.mrb[0].mxu0
  %v3686 = vadd.f32 0.0, %v3685
  %v3687 = vpop.f32.mrb[0].mxu0
  %3688 = vmatprep.mubr.bf16.mxu0 0
  %3689 = vmatmul.mubr.bf16.gmra.mrb[0].mxu0 %v3446
  %v3690 = vpop.f32.mrb[0].mxu0
  %v3691 = vadd.f32 0.0, %v3690
  %v3692 = vpop.f32.mrb[0].mxu0
  %v3693 = vpop.f32.mrb[0].mxu0
  %v3694 = vadd.f32 0.0, %v3693
  %v3695 = vpop.f32.mrb[0].mxu0
  %3696 = vmatprep.mubr.bf16.mxu0 0
  %3697 = vmatmul.mubr.bf16.gmra.mrb[0].mxu0 %v3449
  %v3698 = vpop.f32.mrb[0].mxu0
  %v3699 = vadd.f32 0.0, %v3698
  %v3700 = vpop.f32.mrb[0].mxu0
  %v3701 = vpop.f32.mrb[0].mxu0
  %v3702 = vadd.f32 0.0, %v3701
  %v3703 = vpop.f32.mrb[0].mxu0
  %3704 = vmatprep.mubr.bf16.mxu0 0
  %3705 = vmatmul.mubr.bf16.gmra.mrb[0].mxu0 %v3452
  %v3706 = vpop.f32.mrb[0].mxu0
  %v3707 = vadd.f32 0.0, %v3706
  %v3708 = vpop.f32.mrb[0].mxu0
  %v3709 = vpop.f32.mrb[0].mxu0
  %v3710 = vadd.f32 0.0, %v3709
  %v3711 = vpop.f32.mrb[0].mxu0
  %3712 = vmatprep.mubr.bf16.mxu0 0
  %3713 = vmatmul.mubr.bf16.gmra.mrb[0].mxu0 %v3455
  %v3714 = vpop.f32.mrb[0].mxu0
  %v3715 = vadd.f32 0.0, %v3714
  %v3716 = vpop.f32.mrb[0].mxu0
  %v3717 = vpop.f32.mrb[0].mxu0
  %v3718 = vadd.f32 0.0, %v3717
  %v3719 = vpop.f32.mrb[0].mxu0
  %3720 = vmatprep.mubr.bf16.mxu0 0
  %3721 = vmatmul.mubr.bf16.gmra.mrb[0].mxu0 %v3458
  %v3722 = vpop.f32.mrb[0].mxu0
  %v3723 = vadd.f32 0.0, %v3722
  %v3724 = vpop.f32.mrb[0].mxu0
  %v3725 = vpop.f32.mrb[0].mxu0
  %v3726 = vadd.f32 0.0, %v3725
  %v3727 = vpop.f32.mrb[0].mxu0
  %3728 = vmatprep.mubr.bf16.mxu0 0
  %3729 = vmatmul.mubr.bf16.gmra.mrb[0].mxu0 %v3461
  %v3730 = vpop.f32.mrb[0].mxu0
  %v3731 = vadd.f32 0.0, %v3730
  %v3732 = vpop.f32.mrb[0].mxu0
  %v3733 = vpop.f32.mrb[0].mxu0
  %v3734 = vadd.f32 0.0, %v3733
  %v3735 = vpop.f32.mrb[0].mxu0
  %3736 = vmatprep.mubr.bf16.mxu0 0
  %3737 = vmatmul.mubr.bf16.gmra.mrb[0].mxu0 %v3464
  %v3738 = vpop.f32.mrb[0].mxu0
  %v3739 = vadd.f32 0.0, %v3738
  %v3740 = vpop.f32.mrb[0].mxu0
  %v3741 = vpop.f32.mrb[0].mxu0
  %v3742 = vadd.f32 0.0, %v3741
  %v3743 = vpop.f32.mrb[0].mxu0
  %3744 = vmatprep.mubr.bf16.mxu0 0
  %3745 = vmatmul.mubr.bf16.gmra.mrb[0].mxu0 %v3467
  %v3746 = vpop.f32.mrb[0].mxu0
  %v3747 = vadd.f32 0.0, %v3746
  %v3748 = vpop.f32.mrb[0].mxu0
  %v3749 = vpop.f32.mrb[0].mxu0
  %v3750 = vadd.f32 0.0, %v3749
  %v3751 = vpop.f32.mrb[0].mxu0
  %3752 = vmatprep.mubr.bf16.mxu0 0
  %3753 = vmatmul.mubr.bf16.gmra.mrb[0].mxu0 %v3470
  %v3754 = vpop.f32.mrb[0].mxu0
  %v3755 = vadd.f32 0.0, %v3754
  %v3756 = vpop.f32.mrb[0].mxu0
  %v3757 = vpop.f32.mrb[0].mxu0
  %v3758 = vadd.f32 0.0, %v3757
  %v3759 = vpop.f32.mrb[0].mxu0
  %3760 = vdwg.mxu0
  %v3761 = vadd.f32 %v3198, %v3507
  %v3762 = vadd.f32 %v3199, %v3510
  %v3763 = vadd.f32 %v3200, %v3515
  %v3764 = vadd.f32 %v3201, %v3518
  %v3765 = vadd.f32 %v3202, %v3523
  %v3766 = vadd.f32 %v3203, %v3526
  %v3767 = vadd.f32 %v3204, %v3531
  %v3768 = vadd.f32 %v3205, %v3534
  %v3769 = vadd.f32 %v3206, %v3539
  %v3770 = vadd.f32 %v3207, %v3542
  %v3771 = vadd.f32 %v3208, %v3547
  %v3772 = vadd.f32 %v3209, %v3550
  %v3773 = vadd.f32 %v3210, %v3555
  %v3774 = vadd.f32 %v3211, %v3558
  %v3775 = vadd.f32 %v3212, %v3563
  %v3776 = vadd.f32 %v3213, %v3566
  %v3777 = vadd.f32 %v3214, %v3571
  %v3778 = vadd.f32 %v3215, %v3574
  %v3779 = vadd.f32 %v3216, %v3579
  %v3780 = vadd.f32 %v3217, %v3582
  %v3781 = vadd.f32 %v3218, %v3587
  %v3782 = vadd.f32 %v3219, %v3590
  %v3783 = vadd.f32 %v3220, %v3595
  %v3784 = vadd.f32 %v3221, %v3598
  %v3785 = vadd.f32 %v3222, %v3603
  %v3786 = vadd.f32 %v3223, %v3606
  %v3787 = vadd.f32 %v3224, %v3611
  %v3788 = vadd.f32 %v3225, %v3614
  %v3789 = vadd.f32 %v3226, %v3619
  %v3790 = vadd.f32 %v3227, %v3622
  %v3791 = vadd.f32 %v3228, %v3627
  %v3792 = vadd.f32 %v3229, %v3630
  %v3793 = vadd.f32 %v3230, %v3635
  %v3794 = vadd.f32 %v3231, %v3638
  %v3795 = vadd.f32 %v3232, %v3643
  %v3796 = vadd.f32 %v3233, %v3646
  %v3797 = vadd.f32 %v3234, %v3651
  %v3798 = vadd.f32 %v3235, %v3654
  %v3799 = vadd.f32 %v3236, %v3659
  %v3800 = vadd.f32 %v3237, %v3662
  %v3801 = vadd.f32 %v3238, %v3667
  %v3802 = vadd.f32 %v3239, %v3670
  %v3803 = vadd.f32 %v3240, %v3675
  %v3804 = vadd.f32 %v3241, %v3678
  %v3805 = vadd.f32 %v3242, %v3683
  %v3806 = vadd.f32 %v3243, %v3686
  %v3807 = vadd.f32 %v3244, %v3691
  %v3808 = vadd.f32 %v3245, %v3694
  %v3809 = vadd.f32 %v3246, %v3699
  %v3810 = vadd.f32 %v3247, %v3702
  %v3811 = vadd.f32 %v3248, %v3707
  %v3812 = vadd.f32 %v3249, %v3710
  %v3813 = vadd.f32 %v3250, %v3715
  %v3814 = vadd.f32 %v3251, %v3718
  %v3815 = vadd.f32 %v3252, %v3723
  %v3816 = vadd.f32 %v3253, %v3726
  %v3817 = vadd.f32 %v3254, %v3731
  %v3818 = vadd.f32 %v3255, %v3734
  %v3819 = vadd.f32 %v3256, %v3739
  %v3820 = vadd.f32 %v3257, %v3742
  %v3821 = vadd.f32 %v3258, %v3747
  %v3822 = vadd.f32 %v3259, %v3750
  %v3823 = vadd.f32 %v3260, %v3755
  %v3824 = vadd.f32 %v3261, %v3758
  %s3825 = scalar_lea.vmem %s0, 840
  %v3826 = vld [vmem:[%s3825] sm:$0xff]
  %v3827 = vld [vmem:[%s3825 + $0x8] sm:$0xff]
  %v3828 = vld [vmem:[%s3825 + $0x18] sm:$0xff]
  %v3829 = vld [vmem:[%s3825 + $0x20] sm:$0xff]
  %v3830 = vld [vmem:[%s3825 + $0x30] sm:$0xff]
  %v3831 = vld [vmem:[%s3825 + $0x38] sm:$0xff]
  %v3832 = vld [vmem:[%s3825 + $0x48] sm:$0xff]
  %v3833 = vld [vmem:[%s3825 + $0x50] sm:$0xff]
  %v3834 = vld [vmem:[%s3825 + $0x60] sm:$0xff]
  %v3835 = vld [vmem:[%s3825 + $0x68] sm:$0xff]
  %v3836 = vld [vmem:[%s3825 + $0x78] sm:$0xff]
  %v3837 = vld [vmem:[%s3825 + $0x80] sm:$0xff]
  %v3838 = vld [vmem:[%s3825 + $0x90] sm:$0xff]
  %v3839 = vld [vmem:[%s3825 + $0x98] sm:$0xff]
  %v3840 = vld [vmem:[%s3825 + $0xa8] sm:$0xff]
  %v3841 = vld [vmem:[%s3825 + $0xb0] sm:$0xff]
  %v3842 = vld [vmem:[%s3825 + $0xc0] sm:$0xff]
  %v3843 = vld [vmem:[%s3825 + $0xc8] sm:$0xff]
  %v3844 = vld [vmem:[%s3825 + $0xd8] sm:$0xff]
  %v3845 = vld [vmem:[%s3825 + $0xe0] sm:$0xff]
  %v3846 = vld [vmem:[%s3825 + $0xf0] sm:$0xff]
  %v3847 = vld [vmem:[%s3825 + $0xf8] sm:$0xff]
  %v3848 = vld [vmem:[%s3825 + $0x108] sm:$0xff]
  %v3849 = vld [vmem:[%s3825 + $0x110] sm:$0xff]
  %v3850 = vld [vmem:[%s3825 + $0x120] sm:$0xff]
  %v3851 = vld [vmem:[%s3825 + $0x128] sm:$0xff]
  %v3852 = vld [vmem:[%s3825 + $0x138] sm:$0xff]
  %v3853 = vld [vmem:[%s3825 + $0x140] sm:$0xff]
  %v3854 = vld [vmem:[%s3825 + $0x150] sm:$0xff]
  %v3855 = vld [vmem:[%s3825 + $0x158] sm:$0xff]
  %v3856 = vld [vmem:[%s3825 + $0x168] sm:$0xff]
  %v3857 = vld [vmem:[%s3825 + $0x170] sm:$0xff]
  %v3858 = vld [vmem:[%s3825 + $0x198] sm:$0xff]
  %v3859 = vld [vmem:[%s3825 + $0x1a0] sm:$0xff]
  %v3860 = vld [vmem:[%s3825 + $0x1b0] sm:$0xff]
  %v3861 = vld [vmem:[%s3825 + $0x1b8] sm:$0xff]
  %v3862 = vld [vmem:[%s3825 + $0x1c8] sm:$0xff]
  %v3863 = vld [vmem:[%s3825 + $0x1d0] sm:$0xff]
  %v3864 = vld [vmem:[%s3825 + $0x1e0] sm:$0xff]
  %v3865 = vld [vmem:[%s3825 + $0x1e8] sm:$0xff]
  %v3866 = vld [vmem:[%s3825 + $0x1f8] sm:$0xff]
  %v3867 = vld [vmem:[%s3825 + $0x200] sm:$0xff]
  %v3868 = vld [vmem:[%s3825 + $0x210] sm:$0xff]
  %v3869 = vld [vmem:[%s3825 + $0x218] sm:$0xff]
  %v3870 = vld [vmem:[%s3825 + $0x228] sm:$0xff]
  %v3871 = vld [vmem:[%s3825 + $0x230] sm:$0xff]
  %v3872 = vld [vmem:[%s3825 + $0x240] sm:$0xff]
  %v3873 = vld [vmem:[%s3825 + $0x248] sm:$0xff]
  %v3874 = vld [vmem:[%s3825 + $0x258] sm:$0xff]
  %v3875 = vld [vmem:[%s3825 + $0x260] sm:$0xff]
  %v3876 = vld [vmem:[%s3825 + $0x270] sm:$0xff]
  %v3877 = vld [vmem:[%s3825 + $0x278] sm:$0xff]
  %v3878 = vld [vmem:[%s3825 + $0x288] sm:$0xff]
  %v3879 = vld [vmem:[%s3825 + $0x290] sm:$0xff]
  %v3880 = vld [vmem:[%s3825 + $0x2a0] sm:$0xff]
  %v3881 = vld [vmem:[%s3825 + $0x2a8] sm:$0xff]
  %v3882 = vld [vmem:[%s3825 + $0x2b8] sm:$0xff]
  %v3883 = vld [vmem:[%s3825 + $0x2c0] sm:$0xff]
  %v3884 = vld [vmem:[%s3825 + $0x2d0] sm:$0xff]
  %v3885 = vld [vmem:[%s3825 + $0x2d8] sm:$0xff]
  %v3886 = vld [vmem:[%s3825 + $0x2e8] sm:$0xff]
  %v3887 = vld [vmem:[%s3825 + $0x2f0] sm:$0xff]
  %v3888 = vld [vmem:[%s3825 + $0x300] sm:$0xff]
  %v3889 = vld [vmem:[%s3825 + $0x308] sm:$0xff]
  %v3890 = vpack.c.bf16 %v3827, %v3826
  %v3891 = vpack.c.bf16 %v3829, %v3828
  %v3892 = vpack.c.bf16 %v3831, %v3830
  %v3893 = vpack.c.bf16 %v3833, %v3832
  %v3894 = vpack.c.bf16 %v3835, %v3834
  %v3895 = vpack.c.bf16 %v3837, %v3836
  %v3896 = vpack.c.bf16 %v3839, %v3838
  %v3897 = vpack.c.bf16 %v3841, %v3840
  %v3898 = vpack.c.bf16 %v3843, %v3842
  %v3899 = vpack.c.bf16 %v3845, %v3844
  %v3900 = vpack.c.bf16 %v3847, %v3846
  %v3901 = vpack.c.bf16 %v3849, %v3848
  %v3902 = vpack.c.bf16 %v3851, %v3850
  %v3903 = vpack.c.bf16 %v3853, %v3852
  %v3904 = vpack.c.bf16 %v3855, %v3854
  %v3905 = vpack.c.bf16 %v3857, %v3856
  %v3906 = vpack.c.bf16 %v3859, %v3858
  %v3907 = vpack.c.bf16 %v3861, %v3860
  %v3908 = vpack.c.bf16 %v3863, %v3862
  %v3909 = vpack.c.bf16 %v3865, %v3864
  %v3910 = vpack.c.bf16 %v3867, %v3866
  %v3911 = vpack.c.bf16 %v3869, %v3868
  %v3912 = vpack.c.bf16 %v3871, %v3870
  %v3913 = vpack.c.bf16 %v3873, %v3872
  %v3914 = vpack.c.bf16 %v3875, %v3874
  %v3915 = vpack.c.bf16 %v3877, %v3876
  %v3916 = vpack.c.bf16 %v3879, %v3878
  %v3917 = vpack.c.bf16 %v3881, %v3880
  %v3918 = vpack.c.bf16 %v3883, %v3882
  %v3919 = vpack.c.bf16 %v3885, %v3884
  %v3920 = vpack.c.bf16 %v3887, %v3886
  %v3921 = vpack.c.bf16 %v3889, %v3888
  %s3922 = scalar_lea.vmem %s1, 112
  %v3923 = vld [vmem:[%s3922] sm:$0xf]
  %v3924 = vld [vmem:[%s3922 + $0x4] sm:$0xf]
  %v3925 = vld [vmem:[%s3922 + $0x8] sm:$0xf]
  %v3926 = vld [vmem:[%s3922 + $0xc] sm:$0xf]
  %v3931 = vunpack.c.l.b16 %v3923
  %v3932 = vunpack.c.l.b16 %v3924
  %v3933 = vunpack.c.l.b16 %v3925
  %v3934 = vunpack.c.l.b16 %v3926
  %v3935 = vpack.c.b16 %v3932, %v3931
  %v3936 = vpack.c.b16 %v3934, %v3933
  %v3940 = vsel %vm229, %v3890, 0
  %v3943 = vsel %vm229, %v3891, 0
  %v3946 = vsel %vm229, %v3892, 0
  %v3949 = vsel %vm229, %v3893, 0
  %v3952 = vsel %vm229, %v3894, 0
  %v3955 = vsel %vm229, %v3895, 0
  %v3958 = vsel %vm229, %v3896, 0
  %v3961 = vsel %vm229, %v3897, 0
  %v3964 = vsel %vm229, %v3898, 0
  %v3967 = vsel %vm229, %v3899, 0
  %v3970 = vsel %vm229, %v3900, 0
  %v3973 = vsel %vm229, %v3901, 0
  %v3976 = vsel %vm229, %v3902, 0
  %v3979 = vsel %vm229, %v3903, 0
  %v3982 = vsel %vm229, %v3904, 0
  %v3985 = vsel %vm229, %v3905, 0
  %v3988 = vsel %vm229, %v3906, 0
  %v3991 = vsel %vm229, %v3907, 0
  %v3994 = vsel %vm229, %v3908, 0
  %v3997 = vsel %vm229, %v3909, 0
  %v4000 = vsel %vm229, %v3910, 0
  %v4003 = vsel %vm229, %v3911, 0
  %v4006 = vsel %vm229, %v3912, 0
  %v4009 = vsel %vm229, %v3913, 0
  %v4012 = vsel %vm229, %v3914, 0
  %v4015 = vsel %vm229, %v3915, 0
  %v4018 = vsel %vm229, %v3916, 0
  %v4021 = vsel %vm229, %v3917, 0
  %v4024 = vsel %vm229, %v3918, 0
  %v4027 = vsel %vm229, %v3919, 0
  %v4030 = vsel %vm229, %v3920, 0
  %v4033 = vsel %vm229, %v3921, 0
  %4035 = vmatprep.subr.bf16.mxu0 0
  %4036 = vmatpush1.bf16.msra.mxu0 %v3935
  %4037 = vmatprep.subr.bf16.mxu0 0
  %4038 = vmatpush1.bf16.msra.mxu0 %v3936
  %4039 = vmatprep.subr.bf16.mxu0 0
  %4040 = vmatpush1.bf16.msra.mxu0 0
  %4041 = vmatprep.subr.bf16.mxu0 0
  %4042 = vmatpush1.bf16.msra.mxu0 0
  %4043 = vmatprep.subr.bf16.mxu0 0
  %4044 = vmatpush1.bf16.msra.mxu0 0
  %4045 = vmatprep.subr.bf16.mxu0 0
  %4046 = vmatpush1.bf16.msra.mxu0 0
  %4047 = vmatprep.subr.bf16.mxu0 0
  %4048 = vmatpush1.bf16.msra.mxu0 0
  %4049 = vmatprep.subr.bf16.mxu0 0
  %4050 = vmatpush1.bf16.msra.mxu0 0
  %4051 = vmatprep.subr.bf16.mxu0 0
  %4052 = vmatpush1.bf16.msra.mxu0 0
  %4053 = vmatprep.subr.bf16.mxu0 0
  %4054 = vmatpush1.bf16.msra.mxu0 0
  %4055 = vmatprep.subr.bf16.mxu0 0
  %4056 = vmatpush1.bf16.msra.mxu0 0
  %4057 = vmatprep.subr.bf16.mxu0 0
  %4058 = vmatpush1.bf16.msra.mxu0 0
  %4059 = vmatprep.subr.bf16.mxu0 0
  %4060 = vmatpush1.bf16.msra.mxu0 0
  %4061 = vmatprep.subr.bf16.mxu0 0
  %4062 = vmatpush1.bf16.msra.mxu0 0
  %4063 = vmatprep.subr.bf16.mxu0 0
  %4064 = vmatpush1.bf16.msra.mxu0 0
  %4065 = vmatprep.subr.bf16.mxu0 0
  %4066 = vmatpush1.bf16.msra.mxu0 0
  %4067 = vmatprep.mubr.bf16.mxu0 0
  %4068 = vmatmul.mubr.bf16.gmra.mrb[0].mxu0 %v3940
  %v4069 = vpop.f32.mrb[0].mxu0
  %v4070 = vadd.f32 0.0, %v4069
  %v4071 = vpop.f32.mrb[0].mxu0
  %v4072 = vpop.f32.mrb[0].mxu0
  %v4073 = vadd.f32 0.0, %v4072
  %v4074 = vpop.f32.mrb[0].mxu0
  %4075 = vmatprep.mubr.bf16.mxu0 0
  %4076 = vmatmul.mubr.bf16.gmra.mrb[0].mxu0 %v3943
  %v4077 = vpop.f32.mrb[0].mxu0
  %v4078 = vadd.f32 0.0, %v4077
  %v4079 = vpop.f32.mrb[0].mxu0
  %v4080 = vpop.f32.mrb[0].mxu0
  %v4081 = vadd.f32 0.0, %v4080
  %v4082 = vpop.f32.mrb[0].mxu0
  %4083 = vmatprep.mubr.bf16.mxu0 0
  %4084 = vmatmul.mubr.bf16.gmra.mrb[0].mxu0 %v3946
  %v4085 = vpop.f32.mrb[0].mxu0
  %v4086 = vadd.f32 0.0, %v4085
  %v4087 = vpop.f32.mrb[0].mxu0
  %v4088 = vpop.f32.mrb[0].mxu0
  %v4089 = vadd.f32 0.0, %v4088
  %v4090 = vpop.f32.mrb[0].mxu0
  %4091 = vmatprep.mubr.bf16.mxu0 0
  %4092 = vmatmul.mubr.bf16.gmra.mrb[0].mxu0 %v3949
  %v4093 = vpop.f32.mrb[0].mxu0
  %v4094 = vadd.f32 0.0, %v4093
  %v4095 = vpop.f32.mrb[0].mxu0
  %v4096 = vpop.f32.mrb[0].mxu0
  %v4097 = vadd.f32 0.0, %v4096
  %v4098 = vpop.f32.mrb[0].mxu0
  %4099 = vmatprep.mubr.bf16.mxu0 0
  %4100 = vmatmul.mubr.bf16.gmra.mrb[0].mxu0 %v3952
  %v4101 = vpop.f32.mrb[0].mxu0
  %v4102 = vadd.f32 0.0, %v4101
  %v4103 = vpop.f32.mrb[0].mxu0
  %v4104 = vpop.f32.mrb[0].mxu0
  %v4105 = vadd.f32 0.0, %v4104
  %v4106 = vpop.f32.mrb[0].mxu0
  %4107 = vmatprep.mubr.bf16.mxu0 0
  %4108 = vmatmul.mubr.bf16.gmra.mrb[0].mxu0 %v3955
  %v4109 = vpop.f32.mrb[0].mxu0
  %v4110 = vadd.f32 0.0, %v4109
  %v4111 = vpop.f32.mrb[0].mxu0
  %v4112 = vpop.f32.mrb[0].mxu0
  %v4113 = vadd.f32 0.0, %v4112
  %v4114 = vpop.f32.mrb[0].mxu0
  %4115 = vmatprep.mubr.bf16.mxu0 0
  %4116 = vmatmul.mubr.bf16.gmra.mrb[0].mxu0 %v3958
  %v4117 = vpop.f32.mrb[0].mxu0
  %v4118 = vadd.f32 0.0, %v4117
  %v4119 = vpop.f32.mrb[0].mxu0
  %v4120 = vpop.f32.mrb[0].mxu0
  %v4121 = vadd.f32 0.0, %v4120
  %v4122 = vpop.f32.mrb[0].mxu0
  %4123 = vmatprep.mubr.bf16.mxu0 0
  %4124 = vmatmul.mubr.bf16.gmra.mrb[0].mxu0 %v3961
  %v4125 = vpop.f32.mrb[0].mxu0
  %v4126 = vadd.f32 0.0, %v4125
  %v4127 = vpop.f32.mrb[0].mxu0
  %v4128 = vpop.f32.mrb[0].mxu0
  %v4129 = vadd.f32 0.0, %v4128
  %v4130 = vpop.f32.mrb[0].mxu0
  %4131 = vmatprep.mubr.bf16.mxu0 0
  %4132 = vmatmul.mubr.bf16.gmra.mrb[0].mxu0 %v3964
  %v4133 = vpop.f32.mrb[0].mxu0
  %v4134 = vadd.f32 0.0, %v4133
  %v4135 = vpop.f32.mrb[0].mxu0
  %v4136 = vpop.f32.mrb[0].mxu0
  %v4137 = vadd.f32 0.0, %v4136
  %v4138 = vpop.f32.mrb[0].mxu0
  %4139 = vmatprep.mubr.bf16.mxu0 0
  %4140 = vmatmul.mubr.bf16.gmra.mrb[0].mxu0 %v3967
  %v4141 = vpop.f32.mrb[0].mxu0
  %v4142 = vadd.f32 0.0, %v4141
  %v4143 = vpop.f32.mrb[0].mxu0
  %v4144 = vpop.f32.mrb[0].mxu0
  %v4145 = vadd.f32 0.0, %v4144
  %v4146 = vpop.f32.mrb[0].mxu0
  %4147 = vmatprep.mubr.bf16.mxu0 0
  %4148 = vmatmul.mubr.bf16.gmra.mrb[0].mxu0 %v3970
  %v4149 = vpop.f32.mrb[0].mxu0
  %v4150 = vadd.f32 0.0, %v4149
  %v4151 = vpop.f32.mrb[0].mxu0
  %v4152 = vpop.f32.mrb[0].mxu0
  %v4153 = vadd.f32 0.0, %v4152
  %v4154 = vpop.f32.mrb[0].mxu0
  %4155 = vmatprep.mubr.bf16.mxu0 0
  %4156 = vmatmul.mubr.bf16.gmra.mrb[0].mxu0 %v3973
  %v4157 = vpop.f32.mrb[0].mxu0
  %v4158 = vadd.f32 0.0, %v4157
  %v4159 = vpop.f32.mrb[0].mxu0
  %v4160 = vpop.f32.mrb[0].mxu0
  %v4161 = vadd.f32 0.0, %v4160
  %v4162 = vpop.f32.mrb[0].mxu0
  %4163 = vmatprep.mubr.bf16.mxu0 0
  %4164 = vmatmul.mubr.bf16.gmra.mrb[0].mxu0 %v3976
  %v4165 = vpop.f32.mrb[0].mxu0
  %v4166 = vadd.f32 0.0, %v4165
  %v4167 = vpop.f32.mrb[0].mxu0
  %v4168 = vpop.f32.mrb[0].mxu0
  %v4169 = vadd.f32 0.0, %v4168
  %v4170 = vpop.f32.mrb[0].mxu0
  %4171 = vmatprep.mubr.bf16.mxu0 0
  %4172 = vmatmul.mubr.bf16.gmra.mrb[0].mxu0 %v3979
  %v4173 = vpop.f32.mrb[0].mxu0
  %v4174 = vadd.f32 0.0, %v4173
  %v4175 = vpop.f32.mrb[0].mxu0
  %v4176 = vpop.f32.mrb[0].mxu0
  %v4177 = vadd.f32 0.0, %v4176
  %v4178 = vpop.f32.mrb[0].mxu0
  %4179 = vmatprep.mubr.bf16.mxu0 0
  %4180 = vmatmul.mubr.bf16.gmra.mrb[0].mxu0 %v3982
  %v4181 = vpop.f32.mrb[0].mxu0
  %v4182 = vadd.f32 0.0, %v4181
  %v4183 = vpop.f32.mrb[0].mxu0
  %v4184 = vpop.f32.mrb[0].mxu0
  %v4185 = vadd.f32 0.0, %v4184
  %v4186 = vpop.f32.mrb[0].mxu0
  %4187 = vmatprep.mubr.bf16.mxu0 0
  %4188 = vmatmul.mubr.bf16.gmra.mrb[0].mxu0 %v3985
  %v4189 = vpop.f32.mrb[0].mxu0
  %v4190 = vadd.f32 0.0, %v4189
  %v4191 = vpop.f32.mrb[0].mxu0
  %v4192 = vpop.f32.mrb[0].mxu0
  %v4193 = vadd.f32 0.0, %v4192
  %v4194 = vpop.f32.mrb[0].mxu0
  %4195 = vmatprep.mubr.bf16.mxu0 0
  %4196 = vmatmul.mubr.bf16.gmra.mrb[0].mxu0 %v3988
  %v4197 = vpop.f32.mrb[0].mxu0
  %v4198 = vadd.f32 0.0, %v4197
  %v4199 = vpop.f32.mrb[0].mxu0
  %v4200 = vpop.f32.mrb[0].mxu0
  %v4201 = vadd.f32 0.0, %v4200
  %v4202 = vpop.f32.mrb[0].mxu0
  %4203 = vmatprep.mubr.bf16.mxu0 0
  %4204 = vmatmul.mubr.bf16.gmra.mrb[0].mxu0 %v3991
  %v4205 = vpop.f32.mrb[0].mxu0
  %v4206 = vadd.f32 0.0, %v4205
  %v4207 = vpop.f32.mrb[0].mxu0
  %v4208 = vpop.f32.mrb[0].mxu0
  %v4209 = vadd.f32 0.0, %v4208
  %v4210 = vpop.f32.mrb[0].mxu0
  %4211 = vmatprep.mubr.bf16.mxu0 0
  %4212 = vmatmul.mubr.bf16.gmra.mrb[0].mxu0 %v3994
  %v4213 = vpop.f32.mrb[0].mxu0
  %v4214 = vadd.f32 0.0, %v4213
  %v4215 = vpop.f32.mrb[0].mxu0
  %v4216 = vpop.f32.mrb[0].mxu0
  %v4217 = vadd.f32 0.0, %v4216
  %v4218 = vpop.f32.mrb[0].mxu0
  %4219 = vmatprep.mubr.bf16.mxu0 0
  %4220 = vmatmul.mubr.bf16.gmra.mrb[0].mxu0 %v3997
  %v4221 = vpop.f32.mrb[0].mxu0
  %v4222 = vadd.f32 0.0, %v4221
  %v4223 = vpop.f32.mrb[0].mxu0
  %v4224 = vpop.f32.mrb[0].mxu0
  %v4225 = vadd.f32 0.0, %v4224
  %v4226 = vpop.f32.mrb[0].mxu0
  %4227 = vmatprep.mubr.bf16.mxu0 0
  %4228 = vmatmul.mubr.bf16.gmra.mrb[0].mxu0 %v4000
  %v4229 = vpop.f32.mrb[0].mxu0
  %v4230 = vadd.f32 0.0, %v4229
  %v4231 = vpop.f32.mrb[0].mxu0
  %v4232 = vpop.f32.mrb[0].mxu0
  %v4233 = vadd.f32 0.0, %v4232
  %v4234 = vpop.f32.mrb[0].mxu0
  %4235 = vmatprep.mubr.bf16.mxu0 0
  %4236 = vmatmul.mubr.bf16.gmra.mrb[0].mxu0 %v4003
  %v4237 = vpop.f32.mrb[0].mxu0
  %v4238 = vadd.f32 0.0, %v4237
  %v4239 = vpop.f32.mrb[0].mxu0
  %v4240 = vpop.f32.mrb[0].mxu0
  %v4241 = vadd.f32 0.0, %v4240
  %v4242 = vpop.f32.mrb[0].mxu0
  %4243 = vmatprep.mubr.bf16.mxu0 0
  %4244 = vmatmul.mubr.bf16.gmra.mrb[0].mxu0 %v4006
  %v4245 = vpop.f32.mrb[0].mxu0
  %v4246 = vadd.f32 0.0, %v4245
  %v4247 = vpop.f32.mrb[0].mxu0
  %v4248 = vpop.f32.mrb[0].mxu0
  %v4249 = vadd.f32 0.0, %v4248
  %v4250 = vpop.f32.mrb[0].mxu0
  %4251 = vmatprep.mubr.bf16.mxu0 0
  %4252 = vmatmul.mubr.bf16.gmra.mrb[0].mxu0 %v4009
  %v4253 = vpop.f32.mrb[0].mxu0
  %v4254 = vadd.f32 0.0, %v4253
  %v4255 = vpop.f32.mrb[0].mxu0
  %v4256 = vpop.f32.mrb[0].mxu0
  %v4257 = vadd.f32 0.0, %v4256
  %v4258 = vpop.f32.mrb[0].mxu0
  %4259 = vmatprep.mubr.bf16.mxu0 0
  %4260 = vmatmul.mubr.bf16.gmra.mrb[0].mxu0 %v4012
  %v4261 = vpop.f32.mrb[0].mxu0
  %v4262 = vadd.f32 0.0, %v4261
  %v4263 = vpop.f32.mrb[0].mxu0
  %v4264 = vpop.f32.mrb[0].mxu0
  %v4265 = vadd.f32 0.0, %v4264
  %v4266 = vpop.f32.mrb[0].mxu0
  %4267 = vmatprep.mubr.bf16.mxu0 0
  %4268 = vmatmul.mubr.bf16.gmra.mrb[0].mxu0 %v4015
  %v4269 = vpop.f32.mrb[0].mxu0
  %v4270 = vadd.f32 0.0, %v4269
  %v4271 = vpop.f32.mrb[0].mxu0
  %v4272 = vpop.f32.mrb[0].mxu0
  %v4273 = vadd.f32 0.0, %v4272
  %v4274 = vpop.f32.mrb[0].mxu0
  %4275 = vmatprep.mubr.bf16.mxu0 0
  %4276 = vmatmul.mubr.bf16.gmra.mrb[0].mxu0 %v4018
  %v4277 = vpop.f32.mrb[0].mxu0
  %v4278 = vadd.f32 0.0, %v4277
  %v4279 = vpop.f32.mrb[0].mxu0
  %v4280 = vpop.f32.mrb[0].mxu0
  %v4281 = vadd.f32 0.0, %v4280
  %v4282 = vpop.f32.mrb[0].mxu0
  %4283 = vmatprep.mubr.bf16.mxu0 0
  %4284 = vmatmul.mubr.bf16.gmra.mrb[0].mxu0 %v4021
  %v4285 = vpop.f32.mrb[0].mxu0
  %v4286 = vadd.f32 0.0, %v4285
  %v4287 = vpop.f32.mrb[0].mxu0
  %v4288 = vpop.f32.mrb[0].mxu0
  %v4289 = vadd.f32 0.0, %v4288
  %v4290 = vpop.f32.mrb[0].mxu0
  %4291 = vmatprep.mubr.bf16.mxu0 0
  %4292 = vmatmul.mubr.bf16.gmra.mrb[0].mxu0 %v4024
  %v4293 = vpop.f32.mrb[0].mxu0
  %v4294 = vadd.f32 0.0, %v4293
  %v4295 = vpop.f32.mrb[0].mxu0
  %v4296 = vpop.f32.mrb[0].mxu0
  %v4297 = vadd.f32 0.0, %v4296
  %v4298 = vpop.f32.mrb[0].mxu0
  %4299 = vmatprep.mubr.bf16.mxu0 0
  %4300 = vmatmul.mubr.bf16.gmra.mrb[0].mxu0 %v4027
  %v4301 = vpop.f32.mrb[0].mxu0
  %v4302 = vadd.f32 0.0, %v4301
  %v4303 = vpop.f32.mrb[0].mxu0
  %v4304 = vpop.f32.mrb[0].mxu0
  %v4305 = vadd.f32 0.0, %v4304
  %v4306 = vpop.f32.mrb[0].mxu0
  %4307 = vmatprep.mubr.bf16.mxu0 0
  %4308 = vmatmul.mubr.bf16.gmra.mrb[0].mxu0 %v4030
  %v4309 = vpop.f32.mrb[0].mxu0
  %v4310 = vadd.f32 0.0, %v4309
  %v4311 = vpop.f32.mrb[0].mxu0
  %v4312 = vpop.f32.mrb[0].mxu0
  %v4313 = vadd.f32 0.0, %v4312
  %v4314 = vpop.f32.mrb[0].mxu0
  %4315 = vmatprep.mubr.bf16.mxu0 0
  %4316 = vmatmul.mubr.bf16.gmra.mrb[0].mxu0 %v4033
  %v4317 = vpop.f32.mrb[0].mxu0
  %v4318 = vadd.f32 0.0, %v4317
  %v4319 = vpop.f32.mrb[0].mxu0
  %v4320 = vpop.f32.mrb[0].mxu0
  %v4321 = vadd.f32 0.0, %v4320
  %v4322 = vpop.f32.mrb[0].mxu0
  %4323 = vdwg.mxu0
  %v4324 = vadd.f32 %v3761, %v4070
  %v4325 = vadd.f32 %v3762, %v4073
  %v4326 = vadd.f32 %v3763, %v4078
  %v4327 = vadd.f32 %v3764, %v4081
  %v4328 = vadd.f32 %v3765, %v4086
  %v4329 = vadd.f32 %v3766, %v4089
  %v4330 = vadd.f32 %v3767, %v4094
  %v4331 = vadd.f32 %v3768, %v4097
  %v4332 = vadd.f32 %v3769, %v4102
  %v4333 = vadd.f32 %v3770, %v4105
  %v4334 = vadd.f32 %v3771, %v4110
  %v4335 = vadd.f32 %v3772, %v4113
  %v4336 = vadd.f32 %v3773, %v4118
  %v4337 = vadd.f32 %v3774, %v4121
  %v4338 = vadd.f32 %v3775, %v4126
  %v4339 = vadd.f32 %v3776, %v4129
  %v4340 = vadd.f32 %v3777, %v4134
  %v4341 = vadd.f32 %v3778, %v4137
  %v4342 = vadd.f32 %v3779, %v4142
  %v4343 = vadd.f32 %v3780, %v4145
  %v4344 = vadd.f32 %v3781, %v4150
  %v4345 = vadd.f32 %v3782, %v4153
  %v4346 = vadd.f32 %v3783, %v4158
  %v4347 = vadd.f32 %v3784, %v4161
  %v4348 = vadd.f32 %v3785, %v4166
  %v4349 = vadd.f32 %v3786, %v4169
  %v4350 = vadd.f32 %v3787, %v4174
  %v4351 = vadd.f32 %v3788, %v4177
  %v4352 = vadd.f32 %v3789, %v4182
  %v4353 = vadd.f32 %v3790, %v4185
  %v4354 = vadd.f32 %v3791, %v4190
  %v4355 = vadd.f32 %v3792, %v4193
  %v4356 = vadd.f32 %v3793, %v4198
  %v4357 = vadd.f32 %v3794, %v4201
  %v4358 = vadd.f32 %v3795, %v4206
  %v4359 = vadd.f32 %v3796, %v4209
  %v4360 = vadd.f32 %v3797, %v4214
  %v4361 = vadd.f32 %v3798, %v4217
  %v4362 = vadd.f32 %v3799, %v4222
  %v4363 = vadd.f32 %v3800, %v4225
  %v4364 = vadd.f32 %v3801, %v4230
  %v4365 = vadd.f32 %v3802, %v4233
  %v4366 = vadd.f32 %v3803, %v4238
  %v4367 = vadd.f32 %v3804, %v4241
  %v4368 = vadd.f32 %v3805, %v4246
  %v4369 = vadd.f32 %v3806, %v4249
  %v4370 = vadd.f32 %v3807, %v4254
  %v4371 = vadd.f32 %v3808, %v4257
  %v4372 = vadd.f32 %v3809, %v4262
  %v4373 = vadd.f32 %v3810, %v4265
  %v4374 = vadd.f32 %v3811, %v4270
  %v4375 = vadd.f32 %v3812, %v4273
  %v4376 = vadd.f32 %v3813, %v4278
  %v4377 = vadd.f32 %v3814, %v4281
  %v4378 = vadd.f32 %v3815, %v4286
  %v4379 = vadd.f32 %v3816, %v4289
  %v4380 = vadd.f32 %v3817, %v4294
  %v4381 = vadd.f32 %v3818, %v4297
  %v4382 = vadd.f32 %v3819, %v4302
  %v4383 = vadd.f32 %v3820, %v4305
  %v4384 = vadd.f32 %v3821, %v4310
  %v4385 = vadd.f32 %v3822, %v4313
  %v4386 = vadd.f32 %v3823, %v4318
  %v4387 = vadd.f32 %v3824, %v4321
  %v4388 = vld [vmem:[%s3262 + $0x1] sm:$0xff]
  %v4389 = vld [vmem:[%s3262 + $0x9] sm:$0xff]
  %v4390 = vld [vmem:[%s3262 + $0x19] sm:$0xff]
  %v4391 = vld [vmem:[%s3262 + $0x21] sm:$0xff]
  %v4392 = vld [vmem:[%s3262 + $0x31] sm:$0xff]
  %v4393 = vld [vmem:[%s3262 + $0x39] sm:$0xff]
  %v4394 = vld [vmem:[%s3262 + $0x49] sm:$0xff]
  %v4395 = vld [vmem:[%s3262 + $0x51] sm:$0xff]
  %v4396 = vld [vmem:[%s3262 + $0x61] sm:$0xff]
  %v4397 = vld [vmem:[%s3262 + $0x69] sm:$0xff]
  %v4398 = vld [vmem:[%s3262 + $0x79] sm:$0xff]
  %v4399 = vld [vmem:[%s3262 + $0x81] sm:$0xff]
  %v4400 = vld [vmem:[%s3262 + $0x91] sm:$0xff]
  %v4401 = vld [vmem:[%s3262 + $0x99] sm:$0xff]
  %v4402 = vld [vmem:[%s3262 + $0xa9] sm:$0xff]
  %v4403 = vld [vmem:[%s3262 + $0xb1] sm:$0xff]
  %v4404 = vld [vmem:[%s3262 + $0xc1] sm:$0xff]
  %v4405 = vld [vmem:[%s3262 + $0xc9] sm:$0xff]
  %v4406 = vld [vmem:[%s3262 + $0xd9] sm:$0xff]
  %v4407 = vld [vmem:[%s3262 + $0xe1] sm:$0xff]
  %v4408 = vld [vmem:[%s3262 + $0xf1] sm:$0xff]
  %v4409 = vld [vmem:[%s3262 + $0xf9] sm:$0xff]
  %v4410 = vld [vmem:[%s3262 + $0x109] sm:$0xff]
  %v4411 = vld [vmem:[%s3262 + $0x111] sm:$0xff]
  %v4412 = vld [vmem:[%s3262 + $0x121] sm:$0xff]
  %v4413 = vld [vmem:[%s3262 + $0x129] sm:$0xff]
  %v4414 = vld [vmem:[%s3262 + $0x139] sm:$0xff]
  %v4415 = vld [vmem:[%s3262 + $0x141] sm:$0xff]
  %v4416 = vld [vmem:[%s3262 + $0x151] sm:$0xff]
  %v4417 = vld [vmem:[%s3262 + $0x159] sm:$0xff]
  %v4418 = vld [vmem:[%s3262 + $0x169] sm:$0xff]
  %v4419 = vld [vmem:[%s3262 + $0x171] sm:$0xff]
  %v4420 = vld [vmem:[%s3262 + $0x199] sm:$0xff]
  %v4421 = vld [vmem:[%s3262 + $0x1a1] sm:$0xff]
  %v4422 = vld [vmem:[%s3262 + $0x1b1] sm:$0xff]
  %v4423 = vld [vmem:[%s3262 + $0x1b9] sm:$0xff]
  %v4424 = vld [vmem:[%s3262 + $0x1c9] sm:$0xff]
  %v4425 = vld [vmem:[%s3262 + $0x1d1] sm:$0xff]
  %v4426 = vld [vmem:[%s3262 + $0x1e1] sm:$0xff]
  %v4427 = vld [vmem:[%s3262 + $0x1e9] sm:$0xff]
  %v4428 = vld [vmem:[%s3262 + $0x1f9] sm:$0xff]
  %v4429 = vld [vmem:[%s3262 + $0x201] sm:$0xff]
  %v4430 = vld [vmem:[%s3262 + $0x211] sm:$0xff]
  %v4431 = vld [vmem:[%s3262 + $0x219] sm:$0xff]
  %v4432 = vld [vmem:[%s3262 + $0x229] sm:$0xff]
  %v4433 = vld [vmem:[%s3262 + $0x231] sm:$0xff]
  %v4434 = vld [vmem:[%s3262 + $0x241] sm:$0xff]
  %v4435 = vld [vmem:[%s3262 + $0x249] sm:$0xff]
  %v4436 = vld [vmem:[%s3262 + $0x259] sm:$0xff]
  %v4437 = vld [vmem:[%s3262 + $0x261] sm:$0xff]
  %v4438 = vld [vmem:[%s3262 + $0x271] sm:$0xff]
  %v4439 = vld [vmem:[%s3262 + $0x279] sm:$0xff]
  %v4440 = vld [vmem:[%s3262 + $0x289] sm:$0xff]
  %v4441 = vld [vmem:[%s3262 + $0x291] sm:$0xff]
  %v4442 = vld [vmem:[%s3262 + $0x2a1] sm:$0xff]
  %v4443 = vld [vmem:[%s3262 + $0x2a9] sm:$0xff]
  %v4444 = vld [vmem:[%s3262 + $0x2b9] sm:$0xff]
  %v4445 = vld [vmem:[%s3262 + $0x2c1] sm:$0xff]
  %v4446 = vld [vmem:[%s3262 + $0x2d1] sm:$0xff]
  %v4447 = vld [vmem:[%s3262 + $0x2d9] sm:$0xff]
  %v4448 = vld [vmem:[%s3262 + $0x2e9] sm:$0xff]
  %v4449 = vld [vmem:[%s3262 + $0x2f1] sm:$0xff]
  %v4450 = vld [vmem:[%s3262 + $0x301] sm:$0xff]
  %v4451 = vld [vmem:[%s3262 + $0x309] sm:$0xff]
  %v4452 = vpack.c.bf16 %v4389, %v4388
  %v4453 = vpack.c.bf16 %v4391, %v4390
  %v4454 = vpack.c.bf16 %v4393, %v4392
  %v4455 = vpack.c.bf16 %v4395, %v4394
  %v4456 = vpack.c.bf16 %v4397, %v4396
  %v4457 = vpack.c.bf16 %v4399, %v4398
  %v4458 = vpack.c.bf16 %v4401, %v4400
  %v4459 = vpack.c.bf16 %v4403, %v4402
  %v4460 = vpack.c.bf16 %v4405, %v4404
  %v4461 = vpack.c.bf16 %v4407, %v4406
  %v4462 = vpack.c.bf16 %v4409, %v4408
  %v4463 = vpack.c.bf16 %v4411, %v4410
  %v4464 = vpack.c.bf16 %v4413, %v4412
  %v4465 = vpack.c.bf16 %v4415, %v4414
  %v4466 = vpack.c.bf16 %v4417, %v4416
  %v4467 = vpack.c.bf16 %v4419, %v4418
  %v4468 = vpack.c.bf16 %v4421, %v4420
  %v4469 = vpack.c.bf16 %v4423, %v4422
  %v4470 = vpack.c.bf16 %v4425, %v4424
  %v4471 = vpack.c.bf16 %v4427, %v4426
  %v4472 = vpack.c.bf16 %v4429, %v4428
  %v4473 = vpack.c.bf16 %v4431, %v4430
  %v4474 = vpack.c.bf16 %v4433, %v4432
  %v4475 = vpack.c.bf16 %v4435, %v4434
  %v4476 = vpack.c.bf16 %v4437, %v4436
  %v4477 = vpack.c.bf16 %v4439, %v4438
  %v4478 = vpack.c.bf16 %v4441, %v4440
  %v4479 = vpack.c.bf16 %v4443, %v4442
  %v4480 = vpack.c.bf16 %v4445, %v4444
  %v4481 = vpack.c.bf16 %v4447, %v4446
  %v4482 = vpack.c.bf16 %v4449, %v4448
  %v4483 = vpack.c.bf16 %v4451, %v4450
  %s4484 = scalar_lea.vmem %s1, 128
  %v4485 = vld [vmem:[%s4484] sm:$0xf]
  %v4486 = vld [vmem:[%s4484 + $0x4] sm:$0xf]
  %v4487 = vld [vmem:[%s4484 + $0x8] sm:$0xf]
  %v4488 = vld [vmem:[%s4484 + $0xc] sm:$0xf]
  %v4493 = vunpack.c.l.b16 %v4485
  %v4494 = vunpack.c.l.b16 %v4486
  %v4495 = vunpack.c.l.b16 %v4487
  %v4496 = vunpack.c.l.b16 %v4488
  %v4497 = vpack.c.b16 %v4494, %v4493
  %v4498 = vpack.c.b16 %v4496, %v4495
  %v4502 = vsel %vm229, %v4452, 0
  %v4505 = vsel %vm229, %v4453, 0
  %v4508 = vsel %vm229, %v4454, 0
  %v4511 = vsel %vm229, %v4455, 0
  %v4514 = vsel %vm229, %v4456, 0
  %v4517 = vsel %vm229, %v4457, 0
  %v4520 = vsel %vm229, %v4458, 0
  %v4523 = vsel %vm229, %v4459, 0
  %v4526 = vsel %vm229, %v4460, 0
  %v4529 = vsel %vm229, %v4461, 0
  %v4532 = vsel %vm229, %v4462, 0
  %v4535 = vsel %vm229, %v4463, 0
  %v4538 = vsel %vm229, %v4464, 0
  %v4541 = vsel %vm229, %v4465, 0
  %v4544 = vsel %vm229, %v4466, 0
  %v4547 = vsel %vm229, %v4467, 0
  %v4550 = vsel %vm229, %v4468, 0
  %v4553 = vsel %vm229, %v4469, 0
  %v4556 = vsel %vm229, %v4470, 0
  %v4559 = vsel %vm229, %v4471, 0
  %v4562 = vsel %vm229, %v4472, 0
  %v4565 = vsel %vm229, %v4473, 0
  %v4568 = vsel %vm229, %v4474, 0
  %v4571 = vsel %vm229, %v4475, 0
  %v4574 = vsel %vm229, %v4476, 0
  %v4577 = vsel %vm229, %v4477, 0
  %v4580 = vsel %vm229, %v4478, 0
  %v4583 = vsel %vm229, %v4479, 0
  %v4586 = vsel %vm229, %v4480, 0
  %v4589 = vsel %vm229, %v4481, 0
  %v4592 = vsel %vm229, %v4482, 0
  %v4595 = vsel %vm229, %v4483, 0
  %4597 = vmatprep.subr.bf16.mxu0 0
  %4598 = vmatpush1.bf16.msra.mxu0 %v4497
  %4599 = vmatprep.subr.bf16.mxu0 0
  %4600 = vmatpush1.bf16.msra.mxu0 %v4498
  %4601 = vmatprep.subr.bf16.mxu0 0
  %4602 = vmatpush1.bf16.msra.mxu0 0
  %4603 = vmatprep.subr.bf16.mxu0 0
  %4604 = vmatpush1.bf16.msra.mxu0 0
  %4605 = vmatprep.subr.bf16.mxu0 0
  %4606 = vmatpush1.bf16.msra.mxu0 0
  %4607 = vmatprep.subr.bf16.mxu0 0
  %4608 = vmatpush1.bf16.msra.mxu0 0
  %4609 = vmatprep.subr.bf16.mxu0 0
  %4610 = vmatpush1.bf16.msra.mxu0 0
  %4611 = vmatprep.subr.bf16.mxu0 0
  %4612 = vmatpush1.bf16.msra.mxu0 0
  %4613 = vmatprep.subr.bf16.mxu0 0
  %4614 = vmatpush1.bf16.msra.mxu0 0
  %4615 = vmatprep.subr.bf16.mxu0 0
  %4616 = vmatpush1.bf16.msra.mxu0 0
  %4617 = vmatprep.subr.bf16.mxu0 0
  %4618 = vmatpush1.bf16.msra.mxu0 0
  %4619 = vmatprep.subr.bf16.mxu0 0
  %4620 = vmatpush1.bf16.msra.mxu0 0
  %4621 = vmatprep.subr.bf16.mxu0 0
  %4622 = vmatpush1.bf16.msra.mxu0 0
  %4623 = vmatprep.subr.bf16.mxu0 0
  %4624 = vmatpush1.bf16.msra.mxu0 0
  %4625 = vmatprep.subr.bf16.mxu0 0
  %4626 = vmatpush1.bf16.msra.mxu0 0
  %4627 = vmatprep.subr.bf16.mxu0 0
  %4628 = vmatpush1.bf16.msra.mxu0 0
  %4629 = vmatprep.mubr.bf16.mxu0 0
  %4630 = vmatmul.mubr.bf16.gmra.mrb[0].mxu0 %v4502
  %v4631 = vpop.f32.mrb[0].mxu0
  %v4632 = vadd.f32 0.0, %v4631
  %v4633 = vpop.f32.mrb[0].mxu0
  %v4634 = vpop.f32.mrb[0].mxu0
  %v4635 = vadd.f32 0.0, %v4634
  %v4636 = vpop.f32.mrb[0].mxu0
  %4637 = vmatprep.mubr.bf16.mxu0 0
  %4638 = vmatmul.mubr.bf16.gmra.mrb[0].mxu0 %v4505
  %v4639 = vpop.f32.mrb[0].mxu0
  %v4640 = vadd.f32 0.0, %v4639
  %v4641 = vpop.f32.mrb[0].mxu0
  %v4642 = vpop.f32.mrb[0].mxu0
  %v4643 = vadd.f32 0.0, %v4642
  %v4644 = vpop.f32.mrb[0].mxu0
  %4645 = vmatprep.mubr.bf16.mxu0 0
  %4646 = vmatmul.mubr.bf16.gmra.mrb[0].mxu0 %v4508
  %v4647 = vpop.f32.mrb[0].mxu0
  %v4648 = vadd.f32 0.0, %v4647
  %v4649 = vpop.f32.mrb[0].mxu0
  %v4650 = vpop.f32.mrb[0].mxu0
  %v4651 = vadd.f32 0.0, %v4650
  %v4652 = vpop.f32.mrb[0].mxu0
  %4653 = vmatprep.mubr.bf16.mxu0 0
  %4654 = vmatmul.mubr.bf16.gmra.mrb[0].mxu0 %v4511
  %v4655 = vpop.f32.mrb[0].mxu0
  %v4656 = vadd.f32 0.0, %v4655
  %v4657 = vpop.f32.mrb[0].mxu0
  %v4658 = vpop.f32.mrb[0].mxu0
  %v4659 = vadd.f32 0.0, %v4658
  %v4660 = vpop.f32.mrb[0].mxu0
  %4661 = vmatprep.mubr.bf16.mxu0 0
  %4662 = vmatmul.mubr.bf16.gmra.mrb[0].mxu0 %v4514
  %v4663 = vpop.f32.mrb[0].mxu0
  %v4664 = vadd.f32 0.0, %v4663
  %v4665 = vpop.f32.mrb[0].mxu0
  %v4666 = vpop.f32.mrb[0].mxu0
  %v4667 = vadd.f32 0.0, %v4666
  %v4668 = vpop.f32.mrb[0].mxu0
  %4669 = vmatprep.mubr.bf16.mxu0 0
  %4670 = vmatmul.mubr.bf16.gmra.mrb[0].mxu0 %v4517
  %v4671 = vpop.f32.mrb[0].mxu0
  %v4672 = vadd.f32 0.0, %v4671
  %v4673 = vpop.f32.mrb[0].mxu0
  %v4674 = vpop.f32.mrb[0].mxu0
  %v4675 = vadd.f32 0.0, %v4674
  %v4676 = vpop.f32.mrb[0].mxu0
  %4677 = vmatprep.mubr.bf16.mxu0 0
  %4678 = vmatmul.mubr.bf16.gmra.mrb[0].mxu0 %v4520
  %v4679 = vpop.f32.mrb[0].mxu0
  %v4680 = vadd.f32 0.0, %v4679
  %v4681 = vpop.f32.mrb[0].mxu0
  %v4682 = vpop.f32.mrb[0].mxu0
  %v4683 = vadd.f32 0.0, %v4682
  %v4684 = vpop.f32.mrb[0].mxu0
  %4685 = vmatprep.mubr.bf16.mxu0 0
  %4686 = vmatmul.mubr.bf16.gmra.mrb[0].mxu0 %v4523
  %v4687 = vpop.f32.mrb[0].mxu0
  %v4688 = vadd.f32 0.0, %v4687
  %v4689 = vpop.f32.mrb[0].mxu0
  %v4690 = vpop.f32.mrb[0].mxu0
  %v4691 = vadd.f32 0.0, %v4690
  %v4692 = vpop.f32.mrb[0].mxu0
  %4693 = vmatprep.mubr.bf16.mxu0 0
  %4694 = vmatmul.mubr.bf16.gmra.mrb[0].mxu0 %v4526
  %v4695 = vpop.f32.mrb[0].mxu0
  %v4696 = vadd.f32 0.0, %v4695
  %v4697 = vpop.f32.mrb[0].mxu0
  %v4698 = vpop.f32.mrb[0].mxu0
  %v4699 = vadd.f32 0.0, %v4698
  %v4700 = vpop.f32.mrb[0].mxu0
  %4701 = vmatprep.mubr.bf16.mxu0 0
  %4702 = vmatmul.mubr.bf16.gmra.mrb[0].mxu0 %v4529
  %v4703 = vpop.f32.mrb[0].mxu0
  %v4704 = vadd.f32 0.0, %v4703
  %v4705 = vpop.f32.mrb[0].mxu0
  %v4706 = vpop.f32.mrb[0].mxu0
  %v4707 = vadd.f32 0.0, %v4706
  %v4708 = vpop.f32.mrb[0].mxu0
  %4709 = vmatprep.mubr.bf16.mxu0 0
  %4710 = vmatmul.mubr.bf16.gmra.mrb[0].mxu0 %v4532
  %v4711 = vpop.f32.mrb[0].mxu0
  %v4712 = vadd.f32 0.0, %v4711
  %v4713 = vpop.f32.mrb[0].mxu0
  %v4714 = vpop.f32.mrb[0].mxu0
  %v4715 = vadd.f32 0.0, %v4714
  %v4716 = vpop.f32.mrb[0].mxu0
  %4717 = vmatprep.mubr.bf16.mxu0 0
  %4718 = vmatmul.mubr.bf16.gmra.mrb[0].mxu0 %v4535
  %v4719 = vpop.f32.mrb[0].mxu0
  %v4720 = vadd.f32 0.0, %v4719
  %v4721 = vpop.f32.mrb[0].mxu0
  %v4722 = vpop.f32.mrb[0].mxu0
  %v4723 = vadd.f32 0.0, %v4722
  %v4724 = vpop.f32.mrb[0].mxu0
  %4725 = vmatprep.mubr.bf16.mxu0 0
  %4726 = vmatmul.mubr.bf16.gmra.mrb[0].mxu0 %v4538
  %v4727 = vpop.f32.mrb[0].mxu0
  %v4728 = vadd.f32 0.0, %v4727
  %v4729 = vpop.f32.mrb[0].mxu0
  %v4730 = vpop.f32.mrb[0].mxu0
  %v4731 = vadd.f32 0.0, %v4730
  %v4732 = vpop.f32.mrb[0].mxu0
  %4733 = vmatprep.mubr.bf16.mxu0 0
  %4734 = vmatmul.mubr.bf16.gmra.mrb[0].mxu0 %v4541
  %v4735 = vpop.f32.mrb[0].mxu0
  %v4736 = vadd.f32 0.0, %v4735
  %v4737 = vpop.f32.mrb[0].mxu0
  %v4738 = vpop.f32.mrb[0].mxu0
  %v4739 = vadd.f32 0.0, %v4738
  %v4740 = vpop.f32.mrb[0].mxu0
  %4741 = vmatprep.mubr.bf16.mxu0 0
  %4742 = vmatmul.mubr.bf16.gmra.mrb[0].mxu0 %v4544
  %v4743 = vpop.f32.mrb[0].mxu0
  %v4744 = vadd.f32 0.0, %v4743
  %v4745 = vpop.f32.mrb[0].mxu0
  %v4746 = vpop.f32.mrb[0].mxu0
  %v4747 = vadd.f32 0.0, %v4746
  %v4748 = vpop.f32.mrb[0].mxu0
  %4749 = vmatprep.mubr.bf16.mxu0 0
  %4750 = vmatmul.mubr.bf16.gmra.mrb[0].mxu0 %v4547
  %v4751 = vpop.f32.mrb[0].mxu0
  %v4752 = vadd.f32 0.0, %v4751
  %v4753 = vpop.f32.mrb[0].mxu0
  %v4754 = vpop.f32.mrb[0].mxu0
  %v4755 = vadd.f32 0.0, %v4754
  %v4756 = vpop.f32.mrb[0].mxu0
  %4757 = vmatprep.mubr.bf16.mxu0 0
  %4758 = vmatmul.mubr.bf16.gmra.mrb[0].mxu0 %v4550
  %v4759 = vpop.f32.mrb[0].mxu0
  %v4760 = vadd.f32 0.0, %v4759
  %v4761 = vpop.f32.mrb[0].mxu0
  %v4762 = vpop.f32.mrb[0].mxu0
  %v4763 = vadd.f32 0.0, %v4762
  %v4764 = vpop.f32.mrb[0].mxu0
  %4765 = vmatprep.mubr.bf16.mxu0 0
  %4766 = vmatmul.mubr.bf16.gmra.mrb[0].mxu0 %v4553
  %v4767 = vpop.f32.mrb[0].mxu0
  %v4768 = vadd.f32 0.0, %v4767
  %v4769 = vpop.f32.mrb[0].mxu0
  %v4770 = vpop.f32.mrb[0].mxu0
  %v4771 = vadd.f32 0.0, %v4770
  %v4772 = vpop.f32.mrb[0].mxu0
  %4773 = vmatprep.mubr.bf16.mxu0 0
  %4774 = vmatmul.mubr.bf16.gmra.mrb[0].mxu0 %v4556
  %v4775 = vpop.f32.mrb[0].mxu0
  %v4776 = vadd.f32 0.0, %v4775
  %v4777 = vpop.f32.mrb[0].mxu0
  %v4778 = vpop.f32.mrb[0].mxu0
  %v4779 = vadd.f32 0.0, %v4778
  %v4780 = vpop.f32.mrb[0].mxu0
  %4781 = vmatprep.mubr.bf16.mxu0 0
  %4782 = vmatmul.mubr.bf16.gmra.mrb[0].mxu0 %v4559
  %v4783 = vpop.f32.mrb[0].mxu0
  %v4784 = vadd.f32 0.0, %v4783
  %v4785 = vpop.f32.mrb[0].mxu0
  %v4786 = vpop.f32.mrb[0].mxu0
  %v4787 = vadd.f32 0.0, %v4786
  %v4788 = vpop.f32.mrb[0].mxu0
  %4789 = vmatprep.mubr.bf16.mxu0 0
  %4790 = vmatmul.mubr.bf16.gmra.mrb[0].mxu0 %v4562
  %v4791 = vpop.f32.mrb[0].mxu0
  %v4792 = vadd.f32 0.0, %v4791
  %v4793 = vpop.f32.mrb[0].mxu0
  %v4794 = vpop.f32.mrb[0].mxu0
  %v4795 = vadd.f32 0.0, %v4794
  %v4796 = vpop.f32.mrb[0].mxu0
  %4797 = vmatprep.mubr.bf16.mxu0 0
  %4798 = vmatmul.mubr.bf16.gmra.mrb[0].mxu0 %v4565
  %v4799 = vpop.f32.mrb[0].mxu0
  %v4800 = vadd.f32 0.0, %v4799
  %v4801 = vpop.f32.mrb[0].mxu0
  %v4802 = vpop.f32.mrb[0].mxu0
  %v4803 = vadd.f32 0.0, %v4802
  %v4804 = vpop.f32.mrb[0].mxu0
  %4805 = vmatprep.mubr.bf16.mxu0 0
  %4806 = vmatmul.mubr.bf16.gmra.mrb[0].mxu0 %v4568
  %v4807 = vpop.f32.mrb[0].mxu0
  %v4808 = vadd.f32 0.0, %v4807
  %v4809 = vpop.f32.mrb[0].mxu0
  %v4810 = vpop.f32.mrb[0].mxu0
  %v4811 = vadd.f32 0.0, %v4810
  %v4812 = vpop.f32.mrb[0].mxu0
  %4813 = vmatprep.mubr.bf16.mxu0 0
  %4814 = vmatmul.mubr.bf16.gmra.mrb[0].mxu0 %v4571
  %v4815 = vpop.f32.mrb[0].mxu0
  %v4816 = vadd.f32 0.0, %v4815
  %v4817 = vpop.f32.mrb[0].mxu0
  %v4818 = vpop.f32.mrb[0].mxu0
  %v4819 = vadd.f32 0.0, %v4818
  %v4820 = vpop.f32.mrb[0].mxu0
  %4821 = vmatprep.mubr.bf16.mxu0 0
  %4822 = vmatmul.mubr.bf16.gmra.mrb[0].mxu0 %v4574
  %v4823 = vpop.f32.mrb[0].mxu0
  %v4824 = vadd.f32 0.0, %v4823
  %v4825 = vpop.f32.mrb[0].mxu0
  %v4826 = vpop.f32.mrb[0].mxu0
  %v4827 = vadd.f32 0.0, %v4826
  %v4828 = vpop.f32.mrb[0].mxu0
  %4829 = vmatprep.mubr.bf16.mxu0 0
  %4830 = vmatmul.mubr.bf16.gmra.mrb[0].mxu0 %v4577
  %v4831 = vpop.f32.mrb[0].mxu0
  %v4832 = vadd.f32 0.0, %v4831
  %v4833 = vpop.f32.mrb[0].mxu0
  %v4834 = vpop.f32.mrb[0].mxu0
  %v4835 = vadd.f32 0.0, %v4834
  %v4836 = vpop.f32.mrb[0].mxu0
  %4837 = vmatprep.mubr.bf16.mxu0 0
  %4838 = vmatmul.mubr.bf16.gmra.mrb[0].mxu0 %v4580
  %v4839 = vpop.f32.mrb[0].mxu0
  %v4840 = vadd.f32 0.0, %v4839
  %v4841 = vpop.f32.mrb[0].mxu0
  %v4842 = vpop.f32.mrb[0].mxu0
  %v4843 = vadd.f32 0.0, %v4842
  %v4844 = vpop.f32.mrb[0].mxu0
  %4845 = vmatprep.mubr.bf16.mxu0 0
  %4846 = vmatmul.mubr.bf16.gmra.mrb[0].mxu0 %v4583
  %v4847 = vpop.f32.mrb[0].mxu0
  %v4848 = vadd.f32 0.0, %v4847
  %v4849 = vpop.f32.mrb[0].mxu0
  %v4850 = vpop.f32.mrb[0].mxu0
  %v4851 = vadd.f32 0.0, %v4850
  %v4852 = vpop.f32.mrb[0].mxu0
  %4853 = vmatprep.mubr.bf16.mxu0 0
  %4854 = vmatmul.mubr.bf16.gmra.mrb[0].mxu0 %v4586
  %v4855 = vpop.f32.mrb[0].mxu0
  %v4856 = vadd.f32 0.0, %v4855
  %v4857 = vpop.f32.mrb[0].mxu0
  %v4858 = vpop.f32.mrb[0].mxu0
  %v4859 = vadd.f32 0.0, %v4858
  %v4860 = vpop.f32.mrb[0].mxu0
  %4861 = vmatprep.mubr.bf16.mxu0 0
  %4862 = vmatmul.mubr.bf16.gmra.mrb[0].mxu0 %v4589
  %v4863 = vpop.f32.mrb[0].mxu0
  %v4864 = vadd.f32 0.0, %v4863
  %v4865 = vpop.f32.mrb[0].mxu0
  %v4866 = vpop.f32.mrb[0].mxu0
  %v4867 = vadd.f32 0.0, %v4866
  %v4868 = vpop.f32.mrb[0].mxu0
  %4869 = vmatprep.mubr.bf16.mxu0 0
  %4870 = vmatmul.mubr.bf16.gmra.mrb[0].mxu0 %v4592
  %v4871 = vpop.f32.mrb[0].mxu0
  %v4872 = vadd.f32 0.0, %v4871
  %v4873 = vpop.f32.mrb[0].mxu0
  %v4874 = vpop.f32.mrb[0].mxu0
  %v4875 = vadd.f32 0.0, %v4874
  %v4876 = vpop.f32.mrb[0].mxu0
  %4877 = vmatprep.mubr.bf16.mxu0 0
  %4878 = vmatmul.mubr.bf16.gmra.mrb[0].mxu0 %v4595
  %v4879 = vpop.f32.mrb[0].mxu0
  %v4880 = vadd.f32 0.0, %v4879
  %v4881 = vpop.f32.mrb[0].mxu0
  %v4882 = vpop.f32.mrb[0].mxu0
  %v4883 = vadd.f32 0.0, %v4882
  %v4884 = vpop.f32.mrb[0].mxu0
  %4885 = vdwg.mxu0
  %v4886 = vadd.f32 %v4324, %v4632
  %v4887 = vadd.f32 %v4325, %v4635
  %v4888 = vadd.f32 %v4326, %v4640
  %v4889 = vadd.f32 %v4327, %v4643
  %v4890 = vadd.f32 %v4328, %v4648
  %v4891 = vadd.f32 %v4329, %v4651
  %v4892 = vadd.f32 %v4330, %v4656
  %v4893 = vadd.f32 %v4331, %v4659
  %v4894 = vadd.f32 %v4332, %v4664
  %v4895 = vadd.f32 %v4333, %v4667
  %v4896 = vadd.f32 %v4334, %v4672
  %v4897 = vadd.f32 %v4335, %v4675
  %v4898 = vadd.f32 %v4336, %v4680
  %v4899 = vadd.f32 %v4337, %v4683
  %v4900 = vadd.f32 %v4338, %v4688
  %v4901 = vadd.f32 %v4339, %v4691
  %v4902 = vadd.f32 %v4340, %v4696
  %v4903 = vadd.f32 %v4341, %v4699
  %v4904 = vadd.f32 %v4342, %v4704
  %v4905 = vadd.f32 %v4343, %v4707
  %v4906 = vadd.f32 %v4344, %v4712
  %v4907 = vadd.f32 %v4345, %v4715
  %v4908 = vadd.f32 %v4346, %v4720
  %v4909 = vadd.f32 %v4347, %v4723
  %v4910 = vadd.f32 %v4348, %v4728
  %v4911 = vadd.f32 %v4349, %v4731
  %v4912 = vadd.f32 %v4350, %v4736
  %v4913 = vadd.f32 %v4351, %v4739
  %v4914 = vadd.f32 %v4352, %v4744
  %v4915 = vadd.f32 %v4353, %v4747
  %v4916 = vadd.f32 %v4354, %v4752
  %v4917 = vadd.f32 %v4355, %v4755
  %v4918 = vadd.f32 %v4356, %v4760
  %v4919 = vadd.f32 %v4357, %v4763
  %v4920 = vadd.f32 %v4358, %v4768
  %v4921 = vadd.f32 %v4359, %v4771
  %v4922 = vadd.f32 %v4360, %v4776
  %v4923 = vadd.f32 %v4361, %v4779
  %v4924 = vadd.f32 %v4362, %v4784
  %v4925 = vadd.f32 %v4363, %v4787
  %v4926 = vadd.f32 %v4364, %v4792
  %v4927 = vadd.f32 %v4365, %v4795
  %v4928 = vadd.f32 %v4366, %v4800
  %v4929 = vadd.f32 %v4367, %v4803
  %v4930 = vadd.f32 %v4368, %v4808
  %v4931 = vadd.f32 %v4369, %v4811
  %v4932 = vadd.f32 %v4370, %v4816
  %v4933 = vadd.f32 %v4371, %v4819
  %v4934 = vadd.f32 %v4372, %v4824
  %v4935 = vadd.f32 %v4373, %v4827
  %v4936 = vadd.f32 %v4374, %v4832
  %v4937 = vadd.f32 %v4375, %v4835
  %v4938 = vadd.f32 %v4376, %v4840
  %v4939 = vadd.f32 %v4377, %v4843
  %v4940 = vadd.f32 %v4378, %v4848
  %v4941 = vadd.f32 %v4379, %v4851
  %v4942 = vadd.f32 %v4380, %v4856
  %v4943 = vadd.f32 %v4381, %v4859
  %v4944 = vadd.f32 %v4382, %v4864
  %v4945 = vadd.f32 %v4383, %v4867
  %v4946 = vadd.f32 %v4384, %v4872
  %v4947 = vadd.f32 %v4385, %v4875
  %v4948 = vadd.f32 %v4386, %v4880
  %v4949 = vadd.f32 %v4387, %v4883
  %v4950 = vld [vmem:[%s2] sm:$0x1]
  %v4952 = vlaneseq
  %v4953 = vshrl.u32 %v4952, 7
  %v4954 = vsub.s32 0, %v4953
  %v4955 = vrot.slane %v4950, %v4954
  %v4957 = vadd.f32 %v4886, %v4955
  %v4958 = vadd.f32 %v4887, %v4955
  %v4959 = vadd.f32 %v4888, %v4955
  %v4960 = vadd.f32 %v4889, %v4955
  %v4961 = vadd.f32 %v4890, %v4955
  %v4962 = vadd.f32 %v4891, %v4955
  %v4963 = vadd.f32 %v4892, %v4955
  %v4964 = vadd.f32 %v4893, %v4955
  %v4965 = vadd.f32 %v4894, %v4955
  %v4966 = vadd.f32 %v4895, %v4955
  %v4967 = vadd.f32 %v4896, %v4955
  %v4968 = vadd.f32 %v4897, %v4955
  %v4969 = vadd.f32 %v4898, %v4955
  %v4970 = vadd.f32 %v4899, %v4955
  %v4971 = vadd.f32 %v4900, %v4955
  %v4972 = vadd.f32 %v4901, %v4955
  %v4973 = vadd.f32 %v4902, %v4955
  %v4974 = vadd.f32 %v4903, %v4955
  %v4975 = vadd.f32 %v4904, %v4955
  %v4976 = vadd.f32 %v4905, %v4955
  %v4977 = vadd.f32 %v4906, %v4955
  %v4978 = vadd.f32 %v4907, %v4955
  %v4979 = vadd.f32 %v4908, %v4955
  %v4980 = vadd.f32 %v4909, %v4955
  %v4981 = vadd.f32 %v4910, %v4955
  %v4982 = vadd.f32 %v4911, %v4955
  %v4983 = vadd.f32 %v4912, %v4955
  %v4984 = vadd.f32 %v4913, %v4955
  %v4985 = vadd.f32 %v4914, %v4955
  %v4986 = vadd.f32 %v4915, %v4955
  %v4987 = vadd.f32 %v4916, %v4955
  %v4988 = vadd.f32 %v4917, %v4955
  %v4989 = vadd.f32 %v4918, %v4955
  %v4990 = vadd.f32 %v4919, %v4955
  %v4991 = vadd.f32 %v4920, %v4955
  %v4992 = vadd.f32 %v4921, %v4955
  %v4993 = vadd.f32 %v4922, %v4955
  %v4994 = vadd.f32 %v4923, %v4955
  %v4995 = vadd.f32 %v4924, %v4955
  %v4996 = vadd.f32 %v4925, %v4955
  %v4997 = vadd.f32 %v4926, %v4955
  %v4998 = vadd.f32 %v4927, %v4955
  %v4999 = vadd.f32 %v4928, %v4955
  %v5000 = vadd.f32 %v4929, %v4955
  %v5001 = vadd.f32 %v4930, %v4955
  %v5002 = vadd.f32 %v4931, %v4955
  %v5003 = vadd.f32 %v4932, %v4955
  %v5004 = vadd.f32 %v4933, %v4955
  %v5005 = vadd.f32 %v4934, %v4955
  %v5006 = vadd.f32 %v4935, %v4955
  %v5007 = vadd.f32 %v4936, %v4955
  %v5008 = vadd.f32 %v4937, %v4955
  %v5009 = vadd.f32 %v4938, %v4955
  %v5010 = vadd.f32 %v4939, %v4955
  %v5011 = vadd.f32 %v4940, %v4955
  %v5012 = vadd.f32 %v4941, %v4955
  %v5013 = vadd.f32 %v4942, %v4955
  %v5014 = vadd.f32 %v4943, %v4955
  %v5015 = vadd.f32 %v4944, %v4955
  %v5016 = vadd.f32 %v4945, %v4955
  %v5017 = vadd.f32 %v4946, %v4955
  %v5018 = vadd.f32 %v4947, %v4955
  %v5019 = vadd.f32 %v4948, %v4955
  %v5020 = vadd.f32 %v4949, %v4955
  %v5021 = vmax.f32 %v4957, 0.0
  %v5022 = vmax.f32 %v4958, 0.0
  %v5023 = vmax.f32 %v4959, 0.0
  %v5024 = vmax.f32 %v4960, 0.0
  %v5025 = vmax.f32 %v4961, 0.0
  %v5026 = vmax.f32 %v4962, 0.0
  %v5027 = vmax.f32 %v4963, 0.0
  %v5028 = vmax.f32 %v4964, 0.0
  %v5029 = vmax.f32 %v4965, 0.0
  %v5030 = vmax.f32 %v4966, 0.0
  %v5031 = vmax.f32 %v4967, 0.0
  %v5032 = vmax.f32 %v4968, 0.0
  %v5033 = vmax.f32 %v4969, 0.0
  %v5034 = vmax.f32 %v4970, 0.0
  %v5035 = vmax.f32 %v4971, 0.0
  %v5036 = vmax.f32 %v4972, 0.0
  %v5037 = vmax.f32 %v4973, 0.0
  %v5038 = vmax.f32 %v4974, 0.0
  %v5039 = vmax.f32 %v4975, 0.0
  %v5040 = vmax.f32 %v4976, 0.0
  %v5041 = vmax.f32 %v4977, 0.0
  %v5042 = vmax.f32 %v4978, 0.0
  %v5043 = vmax.f32 %v4979, 0.0
  %v5044 = vmax.f32 %v4980, 0.0
  %v5045 = vmax.f32 %v4981, 0.0
  %v5046 = vmax.f32 %v4982, 0.0
  %v5047 = vmax.f32 %v4983, 0.0
  %v5048 = vmax.f32 %v4984, 0.0
  %v5049 = vmax.f32 %v4985, 0.0
  %v5050 = vmax.f32 %v4986, 0.0
  %v5051 = vmax.f32 %v4987, 0.0
  %v5052 = vmax.f32 %v4988, 0.0
  %v5053 = vmax.f32 %v4989, 0.0
  %v5054 = vmax.f32 %v4990, 0.0
  %v5055 = vmax.f32 %v4991, 0.0
  %v5056 = vmax.f32 %v4992, 0.0
  %v5057 = vmax.f32 %v4993, 0.0
  %v5058 = vmax.f32 %v4994, 0.0
  %v5059 = vmax.f32 %v4995, 0.0
  %v5060 = vmax.f32 %v4996, 0.0
  %v5061 = vmax.f32 %v4997, 0.0
  %v5062 = vmax.f32 %v4998, 0.0
  %v5063 = vmax.f32 %v4999, 0.0
  %v5064 = vmax.f32 %v5000, 0.0
  %v5065 = vmax.f32 %v5001, 0.0
  %v5066 = vmax.f32 %v5002, 0.0
  %v5067 = vmax.f32 %v5003, 0.0
  %v5068 = vmax.f32 %v5004, 0.0
  %v5069 = vmax.f32 %v5005, 0.0
  %v5070 = vmax.f32 %v5006, 0.0
  %v5071 = vmax.f32 %v5007, 0.0
  %v5072 = vmax.f32 %v5008, 0.0
  %v5073 = vmax.f32 %v5009, 0.0
  %v5074 = vmax.f32 %v5010, 0.0
  %v5075 = vmax.f32 %v5011, 0.0
  %v5076 = vmax.f32 %v5012, 0.0
  %v5077 = vmax.f32 %v5013, 0.0
  %v5078 = vmax.f32 %v5014, 0.0
  %v5079 = vmax.f32 %v5015, 0.0
  %v5080 = vmax.f32 %v5016, 0.0
  %v5081 = vmax.f32 %v5017, 0.0
  %v5082 = vmax.f32 %v5018, 0.0
  %v5083 = vmax.f32 %v5019, 0.0
  %v5084 = vmax.f32 %v5020, 0.0
  %vm5085 = vcmask 523264
  %5086 = vst.msk [vmem:[%s3] sm:$0xff] %vm5085, %v5021
  %5087 = vst.msk [vmem:[%s3 + $0x8] sm:$0xff] %vm5085, %v5022
  %5088 = vst.msk [vmem:[%s3 + $0x10] sm:$0xff] %vm5085, %v5023
  %5089 = vst.msk [vmem:[%s3 + $0x18] sm:$0xff] %vm5085, %v5024
  %5090 = vst.msk [vmem:[%s3 + $0x20] sm:$0xff] %vm5085, %v5025
  %5091 = vst.msk [vmem:[%s3 + $0x28] sm:$0xff] %vm5085, %v5026
  %5092 = vst.msk [vmem:[%s3 + $0x30] sm:$0xff] %vm5085, %v5027
  %5093 = vst.msk [vmem:[%s3 + $0x38] sm:$0xff] %vm5085, %v5028
  %5094 = vst.msk [vmem:[%s3 + $0x40] sm:$0xff] %vm5085, %v5029
  %5095 = vst.msk [vmem:[%s3 + $0x48] sm:$0xff] %vm5085, %v5030
  %5096 = vst.msk [vmem:[%s3 + $0x50] sm:$0xff] %vm5085, %v5031
  %5097 = vst.msk [vmem:[%s3 + $0x58] sm:$0xff] %vm5085, %v5032
  %5098 = vst.msk [vmem:[%s3 + $0x60] sm:$0xff] %vm5085, %v5033
  %5099 = vst.msk [vmem:[%s3 + $0x68] sm:$0xff] %vm5085, %v5034
  %5100 = vst.msk [vmem:[%s3 + $0x70] sm:$0xff] %vm5085, %v5035
  %5101 = vst.msk [vmem:[%s3 + $0x78] sm:$0xff] %vm5085, %v5036
  %5102 = vst.msk [vmem:[%s3 + $0x80] sm:$0xff] %vm5085, %v5037
  %5103 = vst.msk [vmem:[%s3 + $0x88] sm:$0xff] %vm5085, %v5038
  %5104 = vst.msk [vmem:[%s3 + $0x90] sm:$0xff] %vm5085, %v5039
  %5105 = vst.msk [vmem:[%s3 + $0x98] sm:$0xff] %vm5085, %v5040
  %5106 = vst.msk [vmem:[%s3 + $0xa0] sm:$0xff] %vm5085, %v5041
  %5107 = vst.msk [vmem:[%s3 + $0xa8] sm:$0xff] %vm5085, %v5042
  %5108 = vst.msk [vmem:[%s3 + $0xb0] sm:$0xff] %vm5085, %v5043
  %5109 = vst.msk [vmem:[%s3 + $0xb8] sm:$0xff] %vm5085, %v5044
  %5110 = vst.msk [vmem:[%s3 + $0xc0] sm:$0xff] %vm5085, %v5045
  %5111 = vst.msk [vmem:[%s3 + $0xc8] sm:$0xff] %vm5085, %v5046
  %5112 = vst.msk [vmem:[%s3 + $0xd0] sm:$0xff] %vm5085, %v5047
  %5113 = vst.msk [vmem:[%s3 + $0xd8] sm:$0xff] %vm5085, %v5048
  %5114 = vst.msk [vmem:[%s3 + $0xe0] sm:$0xff] %vm5085, %v5049
  %5115 = vst.msk [vmem:[%s3 + $0xe8] sm:$0xff] %vm5085, %v5050
  %5116 = vst.msk [vmem:[%s3 + $0xf0] sm:$0xff] %vm5085, %v5051
  %5117 = vst.msk [vmem:[%s3 + $0xf8] sm:$0xff] %vm5085, %v5052
  %5118 = vst.msk [vmem:[%s3 + $0x100] sm:$0xff] %vm5085, %v5053
  %5119 = vst.msk [vmem:[%s3 + $0x108] sm:$0xff] %vm5085, %v5054
  %5120 = vst.msk [vmem:[%s3 + $0x110] sm:$0xff] %vm5085, %v5055
  %5121 = vst.msk [vmem:[%s3 + $0x118] sm:$0xff] %vm5085, %v5056
  %5122 = vst.msk [vmem:[%s3 + $0x120] sm:$0xff] %vm5085, %v5057
  %5123 = vst.msk [vmem:[%s3 + $0x128] sm:$0xff] %vm5085, %v5058
  %5124 = vst.msk [vmem:[%s3 + $0x130] sm:$0xff] %vm5085, %v5059
  %5125 = vst.msk [vmem:[%s3 + $0x138] sm:$0xff] %vm5085, %v5060
  %5126 = vst.msk [vmem:[%s3 + $0x140] sm:$0xff] %vm5085, %v5061
  %5127 = vst.msk [vmem:[%s3 + $0x148] sm:$0xff] %vm5085, %v5062
  %5128 = vst.msk [vmem:[%s3 + $0x150] sm:$0xff] %vm5085, %v5063
  %5129 = vst.msk [vmem:[%s3 + $0x158] sm:$0xff] %vm5085, %v5064
  %5130 = vst.msk [vmem:[%s3 + $0x160] sm:$0xff] %vm5085, %v5065
  %5131 = vst.msk [vmem:[%s3 + $0x168] sm:$0xff] %vm5085, %v5066
  %5132 = vst.msk [vmem:[%s3 + $0x170] sm:$0xff] %vm5085, %v5067
  %5133 = vst.msk [vmem:[%s3 + $0x178] sm:$0xff] %vm5085, %v5068
  %5134 = vst.msk [vmem:[%s3 + $0x180] sm:$0xff] %vm5085, %v5069
  %5135 = vst.msk [vmem:[%s3 + $0x188] sm:$0xff] %vm5085, %v5070
  %5136 = vst.msk [vmem:[%s3 + $0x190] sm:$0xff] %vm5085, %v5071
  %5137 = vst.msk [vmem:[%s3 + $0x198] sm:$0xff] %vm5085, %v5072
  %5138 = vst.msk [vmem:[%s3 + $0x1a0] sm:$0xff] %vm5085, %v5073
  %5139 = vst.msk [vmem:[%s3 + $0x1a8] sm:$0xff] %vm5085, %v5074
  %5140 = vst.msk [vmem:[%s3 + $0x1b0] sm:$0xff] %vm5085, %v5075
  %5141 = vst.msk [vmem:[%s3 + $0x1b8] sm:$0xff] %vm5085, %v5076
  %5142 = vst.msk [vmem:[%s3 + $0x1c0] sm:$0xff] %vm5085, %v5077
  %5143 = vst.msk [vmem:[%s3 + $0x1c8] sm:$0xff] %vm5085, %v5078
  %5144 = vst.msk [vmem:[%s3 + $0x1d0] sm:$0xff] %vm5085, %v5079
  %5145 = vst.msk [vmem:[%s3 + $0x1d8] sm:$0xff] %vm5085, %v5080
  %5146 = vst.msk [vmem:[%s3 + $0x1e0] sm:$0xff] %vm5085, %v5081
  %5147 = vst.msk [vmem:[%s3 + $0x1e8] sm:$0xff] %vm5085, %v5082
  %5148 = vst.msk [vmem:[%s3 + $0x1f0] sm:$0xff] %vm5085, %v5083
  %5149 = vst.msk [vmem:[%s3 + $0x1f8] sm:$0xff] %vm5085, %v5084
  // Predicated region
  $region14: #{encoder_forward.6} parent=0 // pred_check
    _
  $region15: #{encoder_forward.6} parent=0 // pred_check_branch
    %5151 = sbr.rel (0) target = $region17
  $region16: #{encoder_forward.6} parent=0 // pred_region
    _
  $region17: #{encoder_forward.6} parent=0 // pred_fallthru
    _
  // Predicated region
  $region18: #{encoder_forward.6} parent=0 // pred_check
    _
  $region19: #{encoder_forward.6} parent=0 // pred_check_branch
    %5153 = sbr.rel (0) target = $region21
  $region20: #{encoder_forward.6} parent=0 // pred_region
    _
  $region21: #{encoder_forward.6} parent=0 // pred_fallthru
    _

// kernel: encoder_forward.8
$region0: #{encoder_forward.8}
  #allocation0 [shape = 'u32[]', space=smem, size = 0x4, offset = 0x4, fixed_abs, tag = 'smem constant byte address 0x4 - core index']
  #allocation1 [shape = 'u32[144,128]{1,0:T(1,128)}', space=vmem, size = 0x12000, scoped, tag = 'internal scratch']
  %s0 = inlined_call_operand.vmem [shape: bf16[32,1152], index: 0, kind: input, shape index: {}]
  %s1 = inlined_call_operand.vmem [shape: bf16[1152,256], index: 1, kind: input, shape index: {}]
  %s2 = inlined_call_operand.vmem [shape: f32[1,256], index: 2, kind: input, shape index: {}]
  %s3 = inlined_call_operand.vmem [shape: f32[32,256], index: 3, kind: output, shape index: {}]
  %s4 = sld [smem:[#allocation0]]
  $region22: #{encoder_forward.8} parent=0
    _
  %s6 = ssub.s32 1, %s4
  %s7 = scalar_select 0, %s6, %s4
  // Predicated region
  $region2: #{encoder_forward.8} parent=0 // pred_check
    _
  $region3: #{encoder_forward.8} parent=0 // pred_check_branch
    %9 = sbr.rel (0) target = $region5
  $region4: #{encoder_forward.8} parent=0 // pred_region
    _
  $region5: #{encoder_forward.8} parent=0 // pred_fallthru
    _
  // Predicated region
  $region6: #{encoder_forward.8} parent=0 // pred_check
    _
  $region7: #{encoder_forward.8} parent=0 // pred_check_branch
    %11 = sbr.rel (0) target = $region9
  $region8: #{encoder_forward.8} parent=0 // pred_region
    _
  $region9: #{encoder_forward.8} parent=0 // pred_fallthru
    _
  // Predicated region
  $region10: #{encoder_forward.8} parent=0 // pred_check
    _
  $region11: #{encoder_forward.8} parent=0 // pred_check_branch
    %13 = sbr.rel (0) target = $region13
  $region12: #{encoder_forward.8} parent=0 // pred_region
    _
  $region13: #{encoder_forward.8} parent=0 // pred_fallthru
    _
  %v15 = vld [vmem:[%s0] sm:$0xff]
  %v16 = vld [vmem:[%s0 + $0x8] sm:$0xff]
  %v17 = vld [vmem:[%s0 + $0x10] sm:$0xff]
  %v18 = vld [vmem:[%s0 + $0x18] sm:$0xff]
  %v19 = vld [vmem:[%s0 + $0x20] sm:$0xf]
  %v20 = vld [vmem:[%s0 + $0x24] sm:$0xff]
  %v21 = vld [vmem:[%s0 + $0x2c] sm:$0xff]
  %v22 = vld [vmem:[%s0 + $0x34] sm:$0xff]
  %v23 = vld [vmem:[%s0 + $0x3c] sm:$0xff]
  %v24 = vld [vmem:[%s0 + $0x44] sm:$0xf]
  %v25 = vld [vmem:[%s0 + $0x48] sm:$0xff]
  %v26 = vld [vmem:[%s0 + $0x50] sm:$0xff]
  %v27 = vld [vmem:[%s0 + $0x58] sm:$0xff]
  %v28 = vld [vmem:[%s0 + $0x60] sm:$0xff]
  %v29 = vld [vmem:[%s0 + $0x68] sm:$0xf]
  %v30 = vld [vmem:[%s0 + $0x6c] sm:$0xff]
  %v31 = vld [vmem:[%s0 + $0x74] sm:$0xff]
  %v32 = vld [vmem:[%s0 + $0x7c] sm:$0xff]
  %v33 = vld [vmem:[%s0 + $0x84] sm:$0xff]
  %v34 = vld [vmem:[%s0 + $0x8c] sm:$0xf]
  %v35 = vld [vmem:[%s1] sm:$0xff]
  %v36 = vld [vmem:[%s1 + $0x8] sm:$0xff]
  %v37 = vld [vmem:[%s1 + $0x10] sm:$0xff]
  %v38 = vld [vmem:[%s1 + $0x18] sm:$0xff]
  %v39 = vld [vmem:[%s1 + $0x20] sm:$0xff]
  %v40 = vld [vmem:[%s1 + $0x28] sm:$0xff]
  %v41 = vld [vmem:[%s1 + $0x30] sm:$0xff]
  %v42 = vld [vmem:[%s1 + $0x38] sm:$0xff]
  %v43 = vld [vmem:[%s1 + $0x40] sm:$0xff]
  %v44 = vld [vmem:[%s1 + $0x48] sm:$0xff]
  %v45 = vld [vmem:[%s1 + $0x50] sm:$0xff]
  %v46 = vld [vmem:[%s1 + $0x58] sm:$0xff]
  %v47 = vld [vmem:[%s1 + $0x60] sm:$0xff]
  %v48 = vld [vmem:[%s1 + $0x68] sm:$0xff]
  %v49 = vld [vmem:[%s1 + $0x70] sm:$0xff]
  %v50 = vld [vmem:[%s1 + $0x78] sm:$0xff]
  %v51 = vld [vmem:[%s1 + $0x80] sm:$0xff]
  %v52 = vld [vmem:[%s1 + $0x88] sm:$0xff]
  %v53 = vld [vmem:[%s1 + $0x90] sm:$0xff]
  %v54 = vld [vmem:[%s1 + $0x98] sm:$0xff]
  %v55 = vld [vmem:[%s1 + $0xa0] sm:$0xff]
  %v56 = vld [vmem:[%s1 + $0xa8] sm:$0xff]
  %v57 = vld [vmem:[%s1 + $0xb0] sm:$0xff]
  %v58 = vld [vmem:[%s1 + $0xb8] sm:$0xff]
  %v59 = vld [vmem:[%s1 + $0xc0] sm:$0xff]
  %v60 = vld [vmem:[%s1 + $0xc8] sm:$0xff]
  %v61 = vld [vmem:[%s1 + $0xd0] sm:$0xff]
  %v62 = vld [vmem:[%s1 + $0xd8] sm:$0xff]
  %v63 = vld [vmem:[%s1 + $0xe0] sm:$0xff]
  %v64 = vld [vmem:[%s1 + $0xe8] sm:$0xff]
  %v65 = vld [vmem:[%s1 + $0xf0] sm:$0xff]
  %v66 = vld [vmem:[%s1 + $0xf8] sm:$0xff]
  %v67 = vld [vmem:[%s1 + $0x100] sm:$0xff]
  %v68 = vld [vmem:[%s1 + $0x108] sm:$0xff]
  %v69 = vld [vmem:[%s1 + $0x110] sm:$0xff]
  %v70 = vld [vmem:[%s1 + $0x118] sm:$0xff]
  %v71 = vld [vmem:[%s1 + $0x120] sm:$0xff]
  %v72 = vld [vmem:[%s1 + $0x128] sm:$0xff]
  %v73 = vld [vmem:[%s1 + $0x130] sm:$0xff]
  %v74 = vld [vmem:[%s1 + $0x138] sm:$0xff]
  %v75 = vld [vmem:[%s1 + $0x140] sm:$0xff]
  %v76 = vld [vmem:[%s1 + $0x148] sm:$0xff]
  %v77 = vld [vmem:[%s1 + $0x150] sm:$0xff]
  %v78 = vld [vmem:[%s1 + $0x158] sm:$0xff]
  %v79 = vld [vmem:[%s1 + $0x160] sm:$0xff]
  %v80 = vld [vmem:[%s1 + $0x168] sm:$0xff]
  %v81 = vld [vmem:[%s1 + $0x170] sm:$0xff]
  %v82 = vld [vmem:[%s1 + $0x178] sm:$0xff]
  %v83 = vld [vmem:[%s1 + $0x180] sm:$0xff]
  %v84 = vld [vmem:[%s1 + $0x188] sm:$0xff]
  %v85 = vld [vmem:[%s1 + $0x190] sm:$0xff]
  %v86 = vld [vmem:[%s1 + $0x198] sm:$0xff]
  %v87 = vld [vmem:[%s1 + $0x1a0] sm:$0xff]
  %v88 = vld [vmem:[%s1 + $0x1a8] sm:$0xff]
  %v89 = vld [vmem:[%s1 + $0x1b0] sm:$0xff]
  %v90 = vld [vmem:[%s1 + $0x1b8] sm:$0xff]
  %v91 = vld [vmem:[%s1 + $0x1c0] sm:$0xff]
  %v92 = vld [vmem:[%s1 + $0x1c8] sm:$0xff]
  %v93 = vld [vmem:[%s1 + $0x1d0] sm:$0xff]
  %v94 = vld [vmem:[%s1 + $0x1d8] sm:$0xff]
  %v95 = vld [vmem:[%s1 + $0x1e0] sm:$0xff]
  %v96 = vld [vmem:[%s1 + $0x1e8] sm:$0xff]
  %v97 = vld [vmem:[%s1 + $0x1f0] sm:$0xff]
  %v98 = vld [vmem:[%s1 + $0x1f8] sm:$0xff]
  %v99 = vld [vmem:[%s1 + $0x200] sm:$0xff]
  %v100 = vld [vmem:[%s1 + $0x208] sm:$0xff]
  %v101 = vld [vmem:[%s1 + $0x210] sm:$0xff]
  %v102 = vld [vmem:[%s1 + $0x218] sm:$0xff]
  %v103 = vld [vmem:[%s1 + $0x220] sm:$0xff]
  %v104 = vld [vmem:[%s1 + $0x228] sm:$0xff]
  %v105 = vld [vmem:[%s1 + $0x230] sm:$0xff]
  %v106 = vld [vmem:[%s1 + $0x238] sm:$0xff]
  %v107 = vld [vmem:[%s1 + $0x240] sm:$0xff]
  %v108 = vld [vmem:[%s1 + $0x248] sm:$0xff]
  %v109 = vld [vmem:[%s1 + $0x250] sm:$0xff]
  %v110 = vld [vmem:[%s1 + $0x258] sm:$0xff]
  %v111 = vld [vmem:[%s1 + $0x260] sm:$0xff]
  %v112 = vld [vmem:[%s1 + $0x268] sm:$0xff]
  %v113 = vld [vmem:[%s1 + $0x270] sm:$0xff]
  %v114 = vld [vmem:[%s1 + $0x278] sm:$0xff]
  %v115 = vld [vmem:[%s1 + $0x280] sm:$0xff]
  %v116 = vld [vmem:[%s1 + $0x288] sm:$0xff]
  %v117 = vld [vmem:[%s1 + $0x290] sm:$0xff]
  %v118 = vld [vmem:[%s1 + $0x298] sm:$0xff]
  %v119 = vld [vmem:[%s1 + $0x2a0] sm:$0xff]
  %v120 = vld [vmem:[%s1 + $0x2a8] sm:$0xff]
  %v121 = vld [vmem:[%s1 + $0x2b0] sm:$0xff]
  %v122 = vld [vmem:[%s1 + $0x2b8] sm:$0xff]
  %v123 = vld [vmem:[%s1 + $0x2c0] sm:$0xff]
  %v124 = vld [vmem:[%s1 + $0x2c8] sm:$0xff]
  %v125 = vld [vmem:[%s1 + $0x2d0] sm:$0xff]
  %v126 = vld [vmem:[%s1 + $0x2d8] sm:$0xff]
  %v127 = vld [vmem:[%s1 + $0x2e0] sm:$0xff]
  %v128 = vld [vmem:[%s1 + $0x2e8] sm:$0xff]
  %v129 = vld [vmem:[%s1 + $0x2f0] sm:$0xff]
  %v130 = vld [vmem:[%s1 + $0x2f8] sm:$0xff]
  %v131 = vld [vmem:[%s1 + $0x300] sm:$0xff]
  %v132 = vld [vmem:[%s1 + $0x308] sm:$0xff]
  %v133 = vld [vmem:[%s1 + $0x310] sm:$0xff]
  %v134 = vld [vmem:[%s1 + $0x318] sm:$0xff]
  %v135 = vld [vmem:[%s1 + $0x320] sm:$0xff]
  %v136 = vld [vmem:[%s1 + $0x328] sm:$0xff]
  %v137 = vld [vmem:[%s1 + $0x330] sm:$0xff]
  %v138 = vld [vmem:[%s1 + $0x338] sm:$0xff]
  %v139 = vld [vmem:[%s1 + $0x340] sm:$0xff]
  %v140 = vld [vmem:[%s1 + $0x348] sm:$0xff]
  %v141 = vld [vmem:[%s1 + $0x350] sm:$0xff]
  %v142 = vld [vmem:[%s1 + $0x358] sm:$0xff]
  %v143 = vld [vmem:[%s1 + $0x360] sm:$0xff]
  %v144 = vld [vmem:[%s1 + $0x368] sm:$0xff]
  %v145 = vld [vmem:[%s1 + $0x370] sm:$0xff]
  %v146 = vld [vmem:[%s1 + $0x378] sm:$0xff]
  %v147 = vld [vmem:[%s1 + $0x380] sm:$0xff]
  %v148 = vld [vmem:[%s1 + $0x388] sm:$0xff]
  %v149 = vld [vmem:[%s1 + $0x390] sm:$0xff]
  %v150 = vld [vmem:[%s1 + $0x398] sm:$0xff]
  %v151 = vld [vmem:[%s1 + $0x3a0] sm:$0xff]
  %v152 = vld [vmem:[%s1 + $0x3a8] sm:$0xff]
  %v153 = vld [vmem:[%s1 + $0x3b0] sm:$0xff]
  %v154 = vld [vmem:[%s1 + $0x3b8] sm:$0xff]
  %v155 = vld [vmem:[%s1 + $0x3c0] sm:$0xff]
  %v156 = vld [vmem:[%s1 + $0x3c8] sm:$0xff]
  %v157 = vld [vmem:[%s1 + $0x3d0] sm:$0xff]
  %v158 = vld [vmem:[%s1 + $0x3d8] sm:$0xff]
  %v159 = vld [vmem:[%s1 + $0x3e0] sm:$0xff]
  %v160 = vld [vmem:[%s1 + $0x3e8] sm:$0xff]
  %v161 = vld [vmem:[%s1 + $0x3f0] sm:$0xff]
  %v162 = vld [vmem:[%s1 + $0x3f8] sm:$0xff]
  %v163 = vld [vmem:[%s1 + $0x400] sm:$0xff]
  %v164 = vld [vmem:[%s1 + $0x408] sm:$0xff]
  %v165 = vld [vmem:[%s1 + $0x410] sm:$0xff]
  %v166 = vld [vmem:[%s1 + $0x418] sm:$0xff]
  %v167 = vld [vmem:[%s1 + $0x420] sm:$0xff]
  %v168 = vld [vmem:[%s1 + $0x428] sm:$0xff]
  %v169 = vld [vmem:[%s1 + $0x430] sm:$0xff]
  %v170 = vld [vmem:[%s1 + $0x438] sm:$0xff]
  %v171 = vld [vmem:[%s1 + $0x440] sm:$0xff]
  %v172 = vld [vmem:[%s1 + $0x448] sm:$0xff]
  %v173 = vld [vmem:[%s1 + $0x450] sm:$0xff]
  %v174 = vld [vmem:[%s1 + $0x458] sm:$0xff]
  %v175 = vld [vmem:[%s1 + $0x460] sm:$0xff]
  %v176 = vld [vmem:[%s1 + $0x468] sm:$0xff]
  %v177 = vld [vmem:[%s1 + $0x470] sm:$0xff]
  %v178 = vld [vmem:[%s1 + $0x478] sm:$0xff]
  %v179 = vld [vmem:[%s2] sm:$0x3]
  %v181 = vlaneseq
  %v182 = vshrl.u32 %v181, 7
  %v183 = vsub.s32 0, %v182
  %v184 = vrot.slane %v179, %v183
  %v185 = vlaneseq
  %v186 = vshrl.u32 %v185, 7
  %v187 = vsub.s32 1, %v186
  %v188 = vrot.slane %v179, %v187
  %v211 = vunpack.c.l.b16 %v15
  %v212 = vunpack.c.h.b16 %v15
  %v213 = vunpack.c.l.b16 %v16
  %v214 = vunpack.c.h.b16 %v16
  %v215 = vunpack.c.l.b16 %v17
  %v216 = vunpack.c.h.b16 %v17
  %v217 = vunpack.c.l.b16 %v18
  %v218 = vunpack.c.h.b16 %v18
  %v219 = vunpack.c.l.b16 %v19
  %v220 = vunpack.c.l.b16 %v20
  %v221 = vunpack.c.h.b16 %v20
  %v222 = vunpack.c.l.b16 %v21
  %v223 = vunpack.c.h.b16 %v21
  %v224 = vunpack.c.l.b16 %v22
  %v225 = vunpack.c.h.b16 %v22
  %v226 = vunpack.c.l.b16 %v23
  %v227 = vunpack.c.h.b16 %v23
  %v228 = vunpack.c.l.b16 %v24
  %v229 = vunpack.c.l.b16 %v25
  %v230 = vunpack.c.h.b16 %v25
  %v231 = vunpack.c.l.b16 %v26
  %v232 = vunpack.c.h.b16 %v26
  %v233 = vunpack.c.l.b16 %v27
  %v234 = vunpack.c.h.b16 %v27
  %v235 = vunpack.c.l.b16 %v28
  %v236 = vunpack.c.h.b16 %v28
  %v237 = vunpack.c.l.b16 %v29
  %v238 = vunpack.c.l.b16 %v30
  %v239 = vunpack.c.h.b16 %v30
  %v240 = vunpack.c.l.b16 %v31
  %v241 = vunpack.c.h.b16 %v31
  %v242 = vunpack.c.l.b16 %v32
  %v243 = vunpack.c.h.b16 %v32
  %v244 = vunpack.c.l.b16 %v33
  %v245 = vunpack.c.h.b16 %v33
  %v246 = vunpack.c.l.b16 %v34
  %v247 = vpack.c.b16 %v220, %v211
  %v248 = vpack.c.b16 %v221, %v212
  %v249 = vpack.c.b16 %v222, %v213
  %v250 = vpack.c.b16 %v223, %v214
  %v251 = vpack.c.b16 %v224, %v215
  %v252 = vpack.c.b16 %v225, %v216
  %v253 = vpack.c.b16 %v226, %v217
  %v254 = vpack.c.b16 %v227, %v218
  %v255 = vpack.c.b16 %v228, %v219
  %v256 = vpack.c.b16 %v238, %v229
  %v257 = vpack.c.b16 %v239, %v230
  %v258 = vpack.c.b16 %v240, %v231
  %v259 = vpack.c.b16 %v241, %v232
  %v260 = vpack.c.b16 %v242, %v233
  %v261 = vpack.c.b16 %v243, %v234
  %v262 = vpack.c.b16 %v244, %v235
  %v263 = vpack.c.b16 %v245, %v236
  %v264 = vpack.c.b16 %v246, %v237
  %v427 = vunpack.c.l.b16 %v35
  %v428 = vunpack.c.h.b16 %v35
  %v429 = vunpack.c.l.b16 %v36
  %v430 = vunpack.c.h.b16 %v36
  %v431 = vunpack.c.l.b16 %v37
  %v432 = vunpack.c.h.b16 %v37
  %v433 = vunpack.c.l.b16 %v38
  %v434 = vunpack.c.h.b16 %v38
  %v435 = vunpack.c.l.b16 %v39
  %v436 = vunpack.c.h.b16 %v39
  %v437 = vunpack.c.l.b16 %v40
  %v438 = vunpack.c.h.b16 %v40
  %v439 = vunpack.c.l.b16 %v41
  %v440 = vunpack.c.h.b16 %v41
  %v441 = vunpack.c.l.b16 %v42
  %v442 = vunpack.c.h.b16 %v42
  %v443 = vunpack.c.l.b16 %v43
  %v444 = vunpack.c.h.b16 %v43
  %v445 = vunpack.c.l.b16 %v44
  %v446 = vunpack.c.h.b16 %v44
  %v447 = vunpack.c.l.b16 %v45
  %v448 = vunpack.c.h.b16 %v45
  %v449 = vunpack.c.l.b16 %v46
  %v450 = vunpack.c.h.b16 %v46
  %v451 = vunpack.c.l.b16 %v47
  %v452 = vunpack.c.h.b16 %v47
  %v453 = vunpack.c.l.b16 %v48
  %v454 = vunpack.c.h.b16 %v48
  %v455 = vunpack.c.l.b16 %v49
  %v456 = vunpack.c.h.b16 %v49
  %v457 = vunpack.c.l.b16 %v50
  %v458 = vunpack.c.h.b16 %v50
  %v459 = vunpack.c.l.b16 %v51
  %v460 = vunpack.c.h.b16 %v51
  %v461 = vunpack.c.l.b16 %v52
  %v462 = vunpack.c.h.b16 %v52
  %v463 = vunpack.c.l.b16 %v53
  %v464 = vunpack.c.h.b16 %v53
  %v465 = vunpack.c.l.b16 %v54
  %v466 = vunpack.c.h.b16 %v54
  %v467 = vunpack.c.l.b16 %v55
  %v468 = vunpack.c.h.b16 %v55
  %v469 = vunpack.c.l.b16 %v56
  %v470 = vunpack.c.h.b16 %v56
  %v471 = vunpack.c.l.b16 %v57
  %v472 = vunpack.c.h.b16 %v57
  %v473 = vunpack.c.l.b16 %v58
  %v474 = vunpack.c.h.b16 %v58
  %v475 = vunpack.c.l.b16 %v59
  %v476 = vunpack.c.h.b16 %v59
  %v477 = vunpack.c.l.b16 %v60
  %v478 = vunpack.c.h.b16 %v60
  %v479 = vunpack.c.l.b16 %v61
  %v480 = vunpack.c.h.b16 %v61
  %v481 = vunpack.c.l.b16 %v62
  %v482 = vunpack.c.h.b16 %v62
  %v483 = vunpack.c.l.b16 %v63
  %v484 = vunpack.c.h.b16 %v63
  %v485 = vunpack.c.l.b16 %v64
  %v486 = vunpack.c.h.b16 %v64
  %v487 = vunpack.c.l.b16 %v65
  %v488 = vunpack.c.h.b16 %v65
  %v489 = vunpack.c.l.b16 %v66
  %v490 = vunpack.c.h.b16 %v66
  %v491 = vunpack.c.l.b16 %v67
  %v492 = vunpack.c.h.b16 %v67
  %v493 = vunpack.c.l.b16 %v68
  %v494 = vunpack.c.h.b16 %v68
  %v495 = vunpack.c.l.b16 %v69
  %v496 = vunpack.c.h.b16 %v69
  %v497 = vunpack.c.l.b16 %v70
  %v498 = vunpack.c.h.b16 %v70
  %v499 = vunpack.c.l.b16 %v71
  %v500 = vunpack.c.h.b16 %v71
  %v501 = vunpack.c.l.b16 %v72
  %v502 = vunpack.c.h.b16 %v72
  %v503 = vunpack.c.l.b16 %v73
  %v504 = vunpack.c.h.b16 %v73
  %v505 = vunpack.c.l.b16 %v74
  %v506 = vunpack.c.h.b16 %v74
  %v507 = vunpack.c.l.b16 %v75
  %v508 = vunpack.c.h.b16 %v75
  %v509 = vunpack.c.l.b16 %v76
  %v510 = vunpack.c.h.b16 %v76
  %v511 = vunpack.c.l.b16 %v77
  %v512 = vunpack.c.h.b16 %v77
  %v513 = vunpack.c.l.b16 %v78
  %v514 = vunpack.c.h.b16 %v78
  %v515 = vunpack.c.l.b16 %v79
  %v516 = vunpack.c.h.b16 %v79
  %v517 = vunpack.c.l.b16 %v80
  %v518 = vunpack.c.h.b16 %v80
  %v519 = vunpack.c.l.b16 %v81
  %v520 = vunpack.c.h.b16 %v81
  %v521 = vunpack.c.l.b16 %v82
  %v522 = vunpack.c.h.b16 %v82
  %v523 = vunpack.c.l.b16 %v83
  %v524 = vunpack.c.h.b16 %v83
  %v525 = vunpack.c.l.b16 %v84
  %v526 = vunpack.c.h.b16 %v84
  %v527 = vunpack.c.l.b16 %v85
  %v528 = vunpack.c.h.b16 %v85
  %v529 = vunpack.c.l.b16 %v86
  %v530 = vunpack.c.h.b16 %v86
  %v531 = vunpack.c.l.b16 %v87
  %v532 = vunpack.c.h.b16 %v87
  %v533 = vunpack.c.l.b16 %v88
  %v534 = vunpack.c.h.b16 %v88
  %v535 = vunpack.c.l.b16 %v89
  %v536 = vunpack.c.h.b16 %v89
  %v537 = vunpack.c.l.b16 %v90
  %v538 = vunpack.c.h.b16 %v90
  %v539 = vunpack.c.l.b16 %v91
  %v540 = vunpack.c.h.b16 %v91
  %v541 = vunpack.c.l.b16 %v92
  %v542 = vunpack.c.h.b16 %v92
  %v543 = vunpack.c.l.b16 %v93
  %v544 = vunpack.c.h.b16 %v93
  %v545 = vunpack.c.l.b16 %v94
  %v546 = vunpack.c.h.b16 %v94
  %v547 = vunpack.c.l.b16 %v95
  %v548 = vunpack.c.h.b16 %v95
  %v549 = vunpack.c.l.b16 %v96
  %v550 = vunpack.c.h.b16 %v96
  %v551 = vunpack.c.l.b16 %v97
  %v552 = vunpack.c.h.b16 %v97
  %v553 = vunpack.c.l.b16 %v98
  %v554 = vunpack.c.h.b16 %v98
  %v555 = vunpack.c.l.b16 %v99
  %v556 = vunpack.c.h.b16 %v99
  %v557 = vunpack.c.l.b16 %v100
  %v558 = vunpack.c.h.b16 %v100
  %v559 = vunpack.c.l.b16 %v101
  %v560 = vunpack.c.h.b16 %v101
  %v561 = vunpack.c.l.b16 %v102
  %v562 = vunpack.c.h.b16 %v102
  %v563 = vunpack.c.l.b16 %v103
  %v564 = vunpack.c.h.b16 %v103
  %v565 = vunpack.c.l.b16 %v104
  %v566 = vunpack.c.h.b16 %v104
  %v567 = vunpack.c.l.b16 %v105
  %v568 = vunpack.c.h.b16 %v105
  %v569 = vunpack.c.l.b16 %v106
  %v570 = vunpack.c.h.b16 %v106
  %v571 = vunpack.c.l.b16 %v107
  %v572 = vunpack.c.h.b16 %v107
  %v573 = vunpack.c.l.b16 %v108
  %v574 = vunpack.c.h.b16 %v108
  %v575 = vunpack.c.l.b16 %v109
  %v576 = vunpack.c.h.b16 %v109
  %v577 = vunpack.c.l.b16 %v110
  %v578 = vunpack.c.h.b16 %v110
  %v579 = vunpack.c.l.b16 %v111
  %v580 = vunpack.c.h.b16 %v111
  %v581 = vunpack.c.l.b16 %v112
  %v582 = vunpack.c.h.b16 %v112
  %v583 = vunpack.c.l.b16 %v113
  %v584 = vunpack.c.h.b16 %v113
  %v585 = vunpack.c.l.b16 %v114
  %v586 = vunpack.c.h.b16 %v114
  %v587 = vunpack.c.l.b16 %v115
  %v588 = vunpack.c.h.b16 %v115
  %v589 = vunpack.c.l.b16 %v116
  %v590 = vunpack.c.h.b16 %v116
  %v591 = vunpack.c.l.b16 %v117
  %v592 = vunpack.c.h.b16 %v117
  %v593 = vunpack.c.l.b16 %v118
  %v594 = vunpack.c.h.b16 %v118
  %v595 = vunpack.c.l.b16 %v119
  %v596 = vunpack.c.h.b16 %v119
  %v597 = vunpack.c.l.b16 %v120
  %v598 = vunpack.c.h.b16 %v120
  %v599 = vunpack.c.l.b16 %v121
  %v600 = vunpack.c.h.b16 %v121
  %v601 = vunpack.c.l.b16 %v122
  %v602 = vunpack.c.h.b16 %v122
  %v603 = vunpack.c.l.b16 %v123
  %v604 = vunpack.c.h.b16 %v123
  %v605 = vunpack.c.l.b16 %v124
  %v606 = vunpack.c.h.b16 %v124
  %v607 = vunpack.c.l.b16 %v125
  %v608 = vunpack.c.h.b16 %v125
  %v609 = vunpack.c.l.b16 %v126
  %v610 = vunpack.c.h.b16 %v126
  %v611 = vunpack.c.l.b16 %v127
  %v612 = vunpack.c.h.b16 %v127
  %v613 = vunpack.c.l.b16 %v128
  %v614 = vunpack.c.h.b16 %v128
  %v615 = vunpack.c.l.b16 %v129
  %v616 = vunpack.c.h.b16 %v129
  %v617 = vunpack.c.l.b16 %v130
  %v618 = vunpack.c.h.b16 %v130
  %v619 = vunpack.c.l.b16 %v131
  %v620 = vunpack.c.h.b16 %v131
  %v621 = vunpack.c.l.b16 %v132
  %v622 = vunpack.c.h.b16 %v132
  %v623 = vunpack.c.l.b16 %v133
  %v624 = vunpack.c.h.b16 %v133
  %v625 = vunpack.c.l.b16 %v134
  %v626 = vunpack.c.h.b16 %v134
  %v627 = vunpack.c.l.b16 %v135
  %v628 = vunpack.c.h.b16 %v135
  %v629 = vunpack.c.l.b16 %v136
  %v630 = vunpack.c.h.b16 %v136
  %v631 = vunpack.c.l.b16 %v137
  %v632 = vunpack.c.h.b16 %v137
  %v633 = vunpack.c.l.b16 %v138
  %v634 = vunpack.c.h.b16 %v138
  %v635 = vunpack.c.l.b16 %v139
  %v636 = vunpack.c.h.b16 %v139
  %v637 = vunpack.c.l.b16 %v140
  %v638 = vunpack.c.h.b16 %v140
  %v639 = vunpack.c.l.b16 %v141
  %v640 = vunpack.c.h.b16 %v141
  %v641 = vunpack.c.l.b16 %v142
  %v642 = vunpack.c.h.b16 %v142
  %v643 = vunpack.c.l.b16 %v143
  %v644 = vunpack.c.h.b16 %v143
  %v645 = vunpack.c.l.b16 %v144
  %v646 = vunpack.c.h.b16 %v144
  %v647 = vunpack.c.l.b16 %v145
  %v648 = vunpack.c.h.b16 %v145
  %v649 = vunpack.c.l.b16 %v146
  %v650 = vunpack.c.h.b16 %v146
  %v651 = vunpack.c.l.b16 %v147
  %v652 = vunpack.c.h.b16 %v147
  %v653 = vunpack.c.l.b16 %v148
  %v654 = vunpack.c.h.b16 %v148
  %v655 = vunpack.c.l.b16 %v149
  %v656 = vunpack.c.h.b16 %v149
  %v657 = vunpack.c.l.b16 %v150
  %v658 = vunpack.c.h.b16 %v150
  %v659 = vunpack.c.l.b16 %v151
  %v660 = vunpack.c.h.b16 %v151
  %v661 = vunpack.c.l.b16 %v152
  %v662 = vunpack.c.h.b16 %v152
  %v663 = vunpack.c.l.b16 %v153
  %v664 = vunpack.c.h.b16 %v153
  %v665 = vunpack.c.l.b16 %v154
  %v666 = vunpack.c.h.b16 %v154
  %v667 = vunpack.c.l.b16 %v155
  %v668 = vunpack.c.h.b16 %v155
  %v669 = vunpack.c.l.b16 %v156
  %v670 = vunpack.c.h.b16 %v156
  %v671 = vunpack.c.l.b16 %v157
  %v672 = vunpack.c.h.b16 %v157
  %v673 = vunpack.c.l.b16 %v158
  %v674 = vunpack.c.h.b16 %v158
  %v675 = vunpack.c.l.b16 %v159
  %v676 = vunpack.c.h.b16 %v159
  %v677 = vunpack.c.l.b16 %v160
  %v678 = vunpack.c.h.b16 %v160
  %v679 = vunpack.c.l.b16 %v161
  %v680 = vunpack.c.h.b16 %v161
  %v681 = vunpack.c.l.b16 %v162
  %v682 = vunpack.c.h.b16 %v162
  %v683 = vunpack.c.l.b16 %v163
  %v684 = vunpack.c.h.b16 %v163
  %v685 = vunpack.c.l.b16 %v164
  %v686 = vunpack.c.h.b16 %v164
  %v687 = vunpack.c.l.b16 %v165
  %v688 = vunpack.c.h.b16 %v165
  %v689 = vunpack.c.l.b16 %v166
  %v690 = vunpack.c.h.b16 %v166
  %v691 = vunpack.c.l.b16 %v167
  %v692 = vunpack.c.h.b16 %v167
  %v693 = vunpack.c.l.b16 %v168
  %v694 = vunpack.c.h.b16 %v168
  %v695 = vunpack.c.l.b16 %v169
  %v696 = vunpack.c.h.b16 %v169
  %v697 = vunpack.c.l.b16 %v170
  %v698 = vunpack.c.h.b16 %v170
  %v699 = vunpack.c.l.b16 %v171
  %v700 = vunpack.c.h.b16 %v171
  %v701 = vunpack.c.l.b16 %v172
  %v702 = vunpack.c.h.b16 %v172
  %v703 = vunpack.c.l.b16 %v173
  %v704 = vunpack.c.h.b16 %v173
  %v705 = vunpack.c.l.b16 %v174
  %v706 = vunpack.c.h.b16 %v174
  %v707 = vunpack.c.l.b16 %v175
  %v708 = vunpack.c.h.b16 %v175
  %v709 = vunpack.c.l.b16 %v176
  %v710 = vunpack.c.h.b16 %v176
  %v711 = vunpack.c.l.b16 %v177
  %v712 = vunpack.c.h.b16 %v177
  %v713 = vunpack.c.l.b16 %v178
  %v714 = vunpack.c.h.b16 %v178
  %v715 = vpack.c.b16 %v429, %v427
  %v716 = vpack.c.b16 %v430, %v428
  %v717 = vpack.c.b16 %v433, %v431
  %v718 = vpack.c.b16 %v434, %v432
  %v719 = vpack.c.b16 %v437, %v435
  %v720 = vpack.c.b16 %v438, %v436
  %v721 = vpack.c.b16 %v441, %v439
  %v722 = vpack.c.b16 %v442, %v440
  %v723 = vpack.c.b16 %v445, %v443
  %v724 = vpack.c.b16 %v446, %v444
  %v725 = vpack.c.b16 %v449, %v447
  %v726 = vpack.c.b16 %v450, %v448
  %v727 = vpack.c.b16 %v453, %v451
  %v728 = vpack.c.b16 %v454, %v452
  %v729 = vpack.c.b16 %v457, %v455
  %v730 = vpack.c.b16 %v458, %v456
  %v731 = vpack.c.b16 %v461, %v459
  %v732 = vpack.c.b16 %v462, %v460
  %v733 = vpack.c.b16 %v465, %v463
  %v734 = vpack.c.b16 %v466, %v464
  %v735 = vpack.c.b16 %v469, %v467
  %v736 = vpack.c.b16 %v470, %v468
  %v737 = vpack.c.b16 %v473, %v471
  %v738 = vpack.c.b16 %v474, %v472
  %v739 = vpack.c.b16 %v477, %v475
  %v740 = vpack.c.b16 %v478, %v476
  %v741 = vpack.c.b16 %v481, %v479
  %v742 = vpack.c.b16 %v482, %v480
  %v743 = vpack.c.b16 %v485, %v483
  %v744 = vpack.c.b16 %v486, %v484
  %v745 = vpack.c.b16 %v489, %v487
  %v746 = vpack.c.b16 %v490, %v488
  %v747 = vpack.c.b16 %v493, %v491
  %v748 = vpack.c.b16 %v494, %v492
  %v749 = vpack.c.b16 %v497, %v495
  %v750 = vpack.c.b16 %v498, %v496
  %v751 = vpack.c.b16 %v501, %v499
  %v752 = vpack.c.b16 %v502, %v500
  %v753 = vpack.c.b16 %v505, %v503
  %v754 = vpack.c.b16 %v506, %v504
  %v755 = vpack.c.b16 %v509, %v507
  %v756 = vpack.c.b16 %v510, %v508
  %v757 = vpack.c.b16 %v513, %v511
  %v758 = vpack.c.b16 %v514, %v512
  %v759 = vpack.c.b16 %v517, %v515
  %v760 = vpack.c.b16 %v518, %v516
  %v761 = vpack.c.b16 %v521, %v519
  %v762 = vpack.c.b16 %v522, %v520
  %v763 = vpack.c.b16 %v525, %v523
  %v764 = vpack.c.b16 %v526, %v524
  %v765 = vpack.c.b16 %v529, %v527
  %v766 = vpack.c.b16 %v530, %v528
  %v767 = vpack.c.b16 %v533, %v531
  %v768 = vpack.c.b16 %v534, %v532
  %v769 = vpack.c.b16 %v537, %v535
  %v770 = vpack.c.b16 %v538, %v536
  %v771 = vpack.c.b16 %v541, %v539
  %v772 = vpack.c.b16 %v542, %v540
  %v773 = vpack.c.b16 %v545, %v543
  %v774 = vpack.c.b16 %v546, %v544
  %v775 = vpack.c.b16 %v549, %v547
  %v776 = vpack.c.b16 %v550, %v548
  %v777 = vpack.c.b16 %v553, %v551
  %v778 = vpack.c.b16 %v554, %v552
  %v779 = vpack.c.b16 %v557, %v555
  %v780 = vpack.c.b16 %v558, %v556
  %v781 = vpack.c.b16 %v561, %v559
  %v782 = vpack.c.b16 %v562, %v560
  %v783 = vpack.c.b16 %v565, %v563
  %v784 = vpack.c.b16 %v566, %v564
  %v785 = vpack.c.b16 %v569, %v567
  %v786 = vpack.c.b16 %v570, %v568
  %v787 = vpack.c.b16 %v573, %v571
  %v788 = vpack.c.b16 %v574, %v572
  %v789 = vpack.c.b16 %v577, %v575
  %v790 = vpack.c.b16 %v578, %v576
  %v791 = vpack.c.b16 %v581, %v579
  %v792 = vpack.c.b16 %v582, %v580
  %v793 = vpack.c.b16 %v585, %v583
  %v794 = vpack.c.b16 %v586, %v584
  %v795 = vpack.c.b16 %v589, %v587
  %v796 = vpack.c.b16 %v590, %v588
  %v797 = vpack.c.b16 %v593, %v591
  %v798 = vpack.c.b16 %v594, %v592
  %v799 = vpack.c.b16 %v597, %v595
  %v800 = vpack.c.b16 %v598, %v596
  %v801 = vpack.c.b16 %v601, %v599
  %v802 = vpack.c.b16 %v602, %v600
  %v803 = vpack.c.b16 %v605, %v603
  %v804 = vpack.c.b16 %v606, %v604
  %v805 = vpack.c.b16 %v609, %v607
  %v806 = vpack.c.b16 %v610, %v608
  %v807 = vpack.c.b16 %v613, %v611
  %v808 = vpack.c.b16 %v614, %v612
  %v809 = vpack.c.b16 %v617, %v615
  %v810 = vpack.c.b16 %v618, %v616
  %v811 = vpack.c.b16 %v621, %v619
  %v812 = vpack.c.b16 %v622, %v620
  %v813 = vpack.c.b16 %v625, %v623
  %v814 = vpack.c.b16 %v626, %v624
  %v815 = vpack.c.b16 %v629, %v627
  %v816 = vpack.c.b16 %v630, %v628
  %v817 = vpack.c.b16 %v633, %v631
  %v818 = vpack.c.b16 %v634, %v632
  %v819 = vpack.c.b16 %v637, %v635
  %v820 = vpack.c.b16 %v638, %v636
  %v821 = vpack.c.b16 %v641, %v639
  %v822 = vpack.c.b16 %v642, %v640
  %v823 = vpack.c.b16 %v645, %v643
  %v824 = vpack.c.b16 %v646, %v644
  %v825 = vpack.c.b16 %v649, %v647
  %v826 = vpack.c.b16 %v650, %v648
  %v827 = vpack.c.b16 %v653, %v651
  %v828 = vpack.c.b16 %v654, %v652
  %v829 = vpack.c.b16 %v657, %v655
  %v830 = vpack.c.b16 %v658, %v656
  %v831 = vpack.c.b16 %v661, %v659
  %v832 = vpack.c.b16 %v662, %v660
  %v833 = vpack.c.b16 %v665, %v663
  %v834 = vpack.c.b16 %v666, %v664
  %v835 = vpack.c.b16 %v669, %v667
  %v836 = vpack.c.b16 %v670, %v668
  %v837 = vpack.c.b16 %v673, %v671
  %v838 = vpack.c.b16 %v674, %v672
  %v839 = vpack.c.b16 %v677, %v675
  %v840 = vpack.c.b16 %v678, %v676
  %v841 = vpack.c.b16 %v681, %v679
  %v842 = vpack.c.b16 %v682, %v680
  %v843 = vpack.c.b16 %v685, %v683
  %v844 = vpack.c.b16 %v686, %v684
  %v845 = vpack.c.b16 %v689, %v687
  %v846 = vpack.c.b16 %v690, %v688
  %v847 = vpack.c.b16 %v693, %v691
  %v848 = vpack.c.b16 %v694, %v692
  %v849 = vpack.c.b16 %v697, %v695
  %v850 = vpack.c.b16 %v698, %v696
  %v851 = vpack.c.b16 %v701, %v699
  %v852 = vpack.c.b16 %v702, %v700
  %v853 = vpack.c.b16 %v705, %v703
  %v854 = vpack.c.b16 %v706, %v704
  %v855 = vpack.c.b16 %v709, %v707
  %v856 = vpack.c.b16 %v710, %v708
  %v857 = vpack.c.b16 %v713, %v711
  %v858 = vpack.c.b16 %v714, %v712
  %1003 = vmatprep.subr.bf16.mxu0 %v716
  %1004 = vmatpush1.bf16.msra.mxu0 %v715
  %1005 = vmatprep.subr.bf16.mxu0 %v718
  %1006 = vmatpush1.bf16.msra.mxu0 %v717
  %1007 = vmatprep.subr.bf16.mxu0 %v720
  %1008 = vmatpush1.bf16.msra.mxu0 %v719
  %1009 = vmatprep.subr.bf16.mxu0 %v722
  %1010 = vmatpush1.bf16.msra.mxu0 %v721
  %1011 = vmatprep.subr.bf16.mxu0 %v724
  %1012 = vmatpush1.bf16.msra.mxu0 %v723
  %1013 = vmatprep.subr.bf16.mxu0 %v726
  %1014 = vmatpush1.bf16.msra.mxu0 %v725
  %1015 = vmatprep.subr.bf16.mxu0 %v728
  %1016 = vmatpush1.bf16.msra.mxu0 %v727
  %1017 = vmatprep.subr.bf16.mxu0 %v730
  %1018 = vmatpush1.bf16.msra.mxu0 %v729
  %1019 = vmatprep.subr.bf16.mxu0 %v732
  %1020 = vmatpush1.bf16.msra.mxu0 %v731
  %1021 = vmatprep.subr.bf16.mxu0 %v734
  %1022 = vmatpush1.bf16.msra.mxu0 %v733
  %1023 = vmatprep.subr.bf16.mxu0 %v736
  %1024 = vmatpush1.bf16.msra.mxu0 %v735
  %1025 = vmatprep.subr.bf16.mxu0 %v738
  %1026 = vmatpush1.bf16.msra.mxu0 %v737
  %1027 = vmatprep.subr.bf16.mxu0 %v740
  %1028 = vmatpush1.bf16.msra.mxu0 %v739
  %1029 = vmatprep.subr.bf16.mxu0 %v742
  %1030 = vmatpush1.bf16.msra.mxu0 %v741
  %1031 = vmatprep.subr.bf16.mxu0 %v744
  %1032 = vmatpush1.bf16.msra.mxu0 %v743
  %1033 = vmatprep.subr.bf16.mxu0 %v746
  %1034 = vmatpush1.bf16.msra.mxu0 %v745
  %1035 = vmatprep.mubr.bf16.mxu0 %v248
  %1036 = vmatmul.mubr.bf16.gmra.mrb[0].mxu0 %v247
  %v1037 = vpop.f32.mrb[0].mxu0
  %v1038 = vadd.f32 %v184, %v1037
  %v1039 = vpop.f32.mrb[0].mxu0
  %v1040 = vadd.f32 %v188, %v1039
  %v1041 = vpop.f32.mrb[0].mxu0
  %v1042 = vadd.f32 %v184, %v1041
  %v1043 = vpop.f32.mrb[0].mxu0
  %v1044 = vadd.f32 %v188, %v1043
  %1045 = vmatprep.mubr.bf16.mxu0 %v257
  %1046 = vmatmul.mubr.bf16.gmra.mrb[0].mxu0 %v256
  %v1047 = vpop.f32.mrb[0].mxu0
  %v1048 = vadd.f32 %v184, %v1047
  %v1049 = vpop.f32.mrb[0].mxu0
  %v1050 = vadd.f32 %v188, %v1049
  %v1051 = vpop.f32.mrb[0].mxu0
  %v1052 = vadd.f32 %v184, %v1051
  %v1053 = vpop.f32.mrb[0].mxu0
  %v1054 = vadd.f32 %v188, %v1053
  %1055 = vdwg.mxu0
  %1056 = vmatprep.subr.bf16.mxu0 %v748
  %1057 = vmatpush1.bf16.msra.mxu0 %v747
  %1058 = vmatprep.subr.bf16.mxu0 %v750
  %1059 = vmatpush1.bf16.msra.mxu0 %v749
  %1060 = vmatprep.subr.bf16.mxu0 %v752
  %1061 = vmatpush1.bf16.msra.mxu0 %v751
  %1062 = vmatprep.subr.bf16.mxu0 %v754
  %1063 = vmatpush1.bf16.msra.mxu0 %v753
  %1064 = vmatprep.subr.bf16.mxu0 %v756
  %1065 = vmatpush1.bf16.msra.mxu0 %v755
  %1066 = vmatprep.subr.bf16.mxu0 %v758
  %1067 = vmatpush1.bf16.msra.mxu0 %v757
  %1068 = vmatprep.subr.bf16.mxu0 %v760
  %1069 = vmatpush1.bf16.msra.mxu0 %v759
  %1070 = vmatprep.subr.bf16.mxu0 %v762
  %1071 = vmatpush1.bf16.msra.mxu0 %v761
  %1072 = vmatprep.subr.bf16.mxu0 %v764
  %1073 = vmatpush1.bf16.msra.mxu0 %v763
  %1074 = vmatprep.subr.bf16.mxu0 %v766
  %1075 = vmatpush1.bf16.msra.mxu0 %v765
  %1076 = vmatprep.subr.bf16.mxu0 %v768
  %1077 = vmatpush1.bf16.msra.mxu0 %v767
  %1078 = vmatprep.subr.bf16.mxu0 %v770
  %1079 = vmatpush1.bf16.msra.mxu0 %v769
  %1080 = vmatprep.subr.bf16.mxu0 %v772
  %1081 = vmatpush1.bf16.msra.mxu0 %v771
  %1082 = vmatprep.subr.bf16.mxu0 %v774
  %1083 = vmatpush1.bf16.msra.mxu0 %v773
  %1084 = vmatprep.subr.bf16.mxu0 %v776
  %1085 = vmatpush1.bf16.msra.mxu0 %v775
  %1086 = vmatprep.subr.bf16.mxu0 %v778
  %1087 = vmatpush1.bf16.msra.mxu0 %v777
  %1088 = vmatprep.mubr.bf16.mxu0 %v250
  %1089 = vmatmul.mubr.bf16.gmra.mrb[0].mxu0 %v249
  %v1090 = vpop.f32.mrb[0].mxu0
  %v1091 = vadd.f32 %v1038, %v1090
  %v1092 = vpop.f32.mrb[0].mxu0
  %v1093 = vadd.f32 %v1040, %v1092
  %v1094 = vpop.f32.mrb[0].mxu0
  %v1095 = vadd.f32 %v1042, %v1094
  %v1096 = vpop.f32.mrb[0].mxu0
  %v1097 = vadd.f32 %v1044, %v1096
  %1098 = vmatprep.mubr.bf16.mxu0 %v259
  %1099 = vmatmul.mubr.bf16.gmra.mrb[0].mxu0 %v258
  %v1100 = vpop.f32.mrb[0].mxu0
  %v1101 = vadd.f32 %v1048, %v1100
  %v1102 = vpop.f32.mrb[0].mxu0
  %v1103 = vadd.f32 %v1050, %v1102
  %v1104 = vpop.f32.mrb[0].mxu0
  %v1105 = vadd.f32 %v1052, %v1104
  %v1106 = vpop.f32.mrb[0].mxu0
  %v1107 = vadd.f32 %v1054, %v1106
  %1108 = vdwg.mxu0
  %1109 = vmatprep.subr.bf16.mxu0 %v780
  %1110 = vmatpush1.bf16.msra.mxu0 %v779
  %1111 = vmatprep.subr.bf16.mxu0 %v782
  %1112 = vmatpush1.bf16.msra.mxu0 %v781
  %1113 = vmatprep.subr.bf16.mxu0 %v784
  %1114 = vmatpush1.bf16.msra.mxu0 %v783
  %1115 = vmatprep.subr.bf16.mxu0 %v786
  %1116 = vmatpush1.bf16.msra.mxu0 %v785
  %1117 = vmatprep.subr.bf16.mxu0 %v788
  %1118 = vmatpush1.bf16.msra.mxu0 %v787
  %1119 = vmatprep.subr.bf16.mxu0 %v790
  %1120 = vmatpush1.bf16.msra.mxu0 %v789
  %1121 = vmatprep.subr.bf16.mxu0 %v792
  %1122 = vmatpush1.bf16.msra.mxu0 %v791
  %1123 = vmatprep.subr.bf16.mxu0 %v794
  %1124 = vmatpush1.bf16.msra.mxu0 %v793
  %1125 = vmatprep.subr.bf16.mxu0 %v796
  %1126 = vmatpush1.bf16.msra.mxu0 %v795
  %1127 = vmatprep.subr.bf16.mxu0 %v798
  %1128 = vmatpush1.bf16.msra.mxu0 %v797
  %1129 = vmatprep.subr.bf16.mxu0 %v800
  %1130 = vmatpush1.bf16.msra.mxu0 %v799
  %1131 = vmatprep.subr.bf16.mxu0 %v802
  %1132 = vmatpush1.bf16.msra.mxu0 %v801
  %1133 = vmatprep.subr.bf16.mxu0 %v804
  %1134 = vmatpush1.bf16.msra.mxu0 %v803
  %1135 = vmatprep.subr.bf16.mxu0 %v806
  %1136 = vmatpush1.bf16.msra.mxu0 %v805
  %1137 = vmatprep.subr.bf16.mxu0 %v808
  %1138 = vmatpush1.bf16.msra.mxu0 %v807
  %1139 = vmatprep.subr.bf16.mxu0 %v810
  %1140 = vmatpush1.bf16.msra.mxu0 %v809
  %1141 = vmatprep.mubr.bf16.mxu0 %v252
  %1142 = vmatmul.mubr.bf16.gmra.mrb[0].mxu0 %v251
  %v1143 = vpop.f32.mrb[0].mxu0
  %v1144 = vadd.f32 %v1091, %v1143
  %v1145 = vpop.f32.mrb[0].mxu0
  %v1146 = vadd.f32 %v1093, %v1145
  %v1147 = vpop.f32.mrb[0].mxu0
  %v1148 = vadd.f32 %v1095, %v1147
  %v1149 = vpop.f32.mrb[0].mxu0
  %v1150 = vadd.f32 %v1097, %v1149
  %1151 = vmatprep.mubr.bf16.mxu0 %v261
  %1152 = vmatmul.mubr.bf16.gmra.mrb[0].mxu0 %v260
  %v1153 = vpop.f32.mrb[0].mxu0
  %v1154 = vadd.f32 %v1101, %v1153
  %v1155 = vpop.f32.mrb[0].mxu0
  %v1156 = vadd.f32 %v1103, %v1155
  %v1157 = vpop.f32.mrb[0].mxu0
  %v1158 = vadd.f32 %v1105, %v1157
  %v1159 = vpop.f32.mrb[0].mxu0
  %v1160 = vadd.f32 %v1107, %v1159
  %1161 = vdwg.mxu0
  %1162 = vmatprep.subr.bf16.mxu0 %v812
  %1163 = vmatpush1.bf16.msra.mxu0 %v811
  %1164 = vmatprep.subr.bf16.mxu0 %v814
  %1165 = vmatpush1.bf16.msra.mxu0 %v813
  %1166 = vmatprep.subr.bf16.mxu0 %v816
  %1167 = vmatpush1.bf16.msra.mxu0 %v815
  %1168 = vmatprep.subr.bf16.mxu0 %v818
  %1169 = vmatpush1.bf16.msra.mxu0 %v817
  %1170 = vmatprep.subr.bf16.mxu0 %v820
  %1171 = vmatpush1.bf16.msra.mxu0 %v819
  %1172 = vmatprep.subr.bf16.mxu0 %v822
  %1173 = vmatpush1.bf16.msra.mxu0 %v821
  %1174 = vmatprep.subr.bf16.mxu0 %v824
  %1175 = vmatpush1.bf16.msra.mxu0 %v823
  %1176 = vmatprep.subr.bf16.mxu0 %v826
  %1177 = vmatpush1.bf16.msra.mxu0 %v825
  %1178 = vmatprep.subr.bf16.mxu0 %v828
  %1179 = vmatpush1.bf16.msra.mxu0 %v827
  %1180 = vmatprep.subr.bf16.mxu0 %v830
  %1181 = vmatpush1.bf16.msra.mxu0 %v829
  %1182 = vmatprep.subr.bf16.mxu0 %v832
  %1183 = vmatpush1.bf16.msra.mxu0 %v831
  %1184 = vmatprep.subr.bf16.mxu0 %v834
  %1185 = vmatpush1.bf16.msra.mxu0 %v833
  %1186 = vmatprep.subr.bf16.mxu0 %v836
  %1187 = vmatpush1.bf16.msra.mxu0 %v835
  %1188 = vmatprep.subr.bf16.mxu0 %v838
  %1189 = vmatpush1.bf16.msra.mxu0 %v837
  %1190 = vmatprep.subr.bf16.mxu0 %v840
  %1191 = vmatpush1.bf16.msra.mxu0 %v839
  %1192 = vmatprep.subr.bf16.mxu0 %v842
  %1193 = vmatpush1.bf16.msra.mxu0 %v841
  %1194 = vmatprep.mubr.bf16.mxu0 %v254
  %1195 = vmatmul.mubr.bf16.gmra.mrb[0].mxu0 %v253
  %v1196 = vpop.f32.mrb[0].mxu0
  %v1197 = vadd.f32 %v1144, %v1196
  %v1198 = vpop.f32.mrb[0].mxu0
  %v1199 = vadd.f32 %v1146, %v1198
  %v1200 = vpop.f32.mrb[0].mxu0
  %v1201 = vadd.f32 %v1148, %v1200
  %v1202 = vpop.f32.mrb[0].mxu0
  %v1203 = vadd.f32 %v1150, %v1202
  %1204 = vmatprep.mubr.bf16.mxu0 %v263
  %1205 = vmatmul.mubr.bf16.gmra.mrb[0].mxu0 %v262
  %v1206 = vpop.f32.mrb[0].mxu0
  %v1207 = vadd.f32 %v1154, %v1206
  %v1208 = vpop.f32.mrb[0].mxu0
  %v1209 = vadd.f32 %v1156, %v1208
  %v1210 = vpop.f32.mrb[0].mxu0
  %v1211 = vadd.f32 %v1158, %v1210
  %v1212 = vpop.f32.mrb[0].mxu0
  %v1213 = vadd.f32 %v1160, %v1212
  %1214 = vdwg.mxu0
  %1215 = vmatprep.subr.bf16.mxu0 %v844
  %1216 = vmatpush1.bf16.msra.mxu0 %v843
  %1217 = vmatprep.subr.bf16.mxu0 %v846
  %1218 = vmatpush1.bf16.msra.mxu0 %v845
  %1219 = vmatprep.subr.bf16.mxu0 %v848
  %1220 = vmatpush1.bf16.msra.mxu0 %v847
  %1221 = vmatprep.subr.bf16.mxu0 %v850
  %1222 = vmatpush1.bf16.msra.mxu0 %v849
  %1223 = vmatprep.subr.bf16.mxu0 %v852
  %1224 = vmatpush1.bf16.msra.mxu0 %v851
  %1225 = vmatprep.subr.bf16.mxu0 %v854
  %1226 = vmatpush1.bf16.msra.mxu0 %v853
  %1227 = vmatprep.subr.bf16.mxu0 %v856
  %1228 = vmatpush1.bf16.msra.mxu0 %v855
  %1229 = vmatprep.subr.bf16.mxu0 %v858
  %1230 = vmatpush1.bf16.msra.mxu0 %v857
  %1231 = vmatprep.subr.bf16.mxu0 0
  %1232 = vmatpush1.bf16.msra.mxu0 0
  %1233 = vmatprep.subr.bf16.mxu0 0
  %1234 = vmatpush1.bf16.msra.mxu0 0
  %1235 = vmatprep.subr.bf16.mxu0 0
  %1236 = vmatpush1.bf16.msra.mxu0 0
  %1237 = vmatprep.subr.bf16.mxu0 0
  %1238 = vmatpush1.bf16.msra.mxu0 0
  %1239 = vmatprep.subr.bf16.mxu0 0
  %1240 = vmatpush1.bf16.msra.mxu0 0
  %1241 = vmatprep.subr.bf16.mxu0 0
  %1242 = vmatpush1.bf16.msra.mxu0 0
  %1243 = vmatprep.subr.bf16.mxu0 0
  %1244 = vmatpush1.bf16.msra.mxu0 0
  %1245 = vmatprep.subr.bf16.mxu0 0
  %1246 = vmatpush1.bf16.msra.mxu0 0
  %1247 = vmatprep.mubr.bf16.mxu0 0
  %1248 = vmatmul.mubr.bf16.gmra.mrb[0].mxu0 %v255
  %v1249 = vpop.f32.mrb[0].mxu0
  %v1250 = vadd.f32 %v1197, %v1249
  %v1251 = vpop.f32.mrb[0].mxu0
  %v1252 = vadd.f32 %v1199, %v1251
  %v1253 = vpop.f32.mrb[0].mxu0
  %v1254 = vadd.f32 %v1201, %v1253
  %v1255 = vpop.f32.mrb[0].mxu0
  %v1256 = vadd.f32 %v1203, %v1255
  %1257 = vmatprep.mubr.bf16.mxu0 0
  %1258 = vmatmul.mubr.bf16.gmra.mrb[0].mxu0 %v264
  %v1259 = vpop.f32.mrb[0].mxu0
  %v1260 = vadd.f32 %v1207, %v1259
  %v1261 = vpop.f32.mrb[0].mxu0
  %v1262 = vadd.f32 %v1209, %v1261
  %v1263 = vpop.f32.mrb[0].mxu0
  %v1264 = vadd.f32 %v1211, %v1263
  %v1265 = vpop.f32.mrb[0].mxu0
  %v1266 = vadd.f32 %v1213, %v1265
  %1267 = vdwg.mxu0
  %v1268 = vmax.f32 %v1250, 0.0
  %v1269 = vmax.f32 %v1252, 0.0
  %v1270 = vmax.f32 %v1254, 0.0
  %v1271 = vmax.f32 %v1256, 0.0
  %v1272 = vmax.f32 %v1260, 0.0
  %v1273 = vmax.f32 %v1262, 0.0
  %v1274 = vmax.f32 %v1264, 0.0
  %v1275 = vmax.f32 %v1266, 0.0
  %1276 = vst [vmem:[%s3] sm:$0xff] %v1268
  %1277 = vst [vmem:[%s3 + $0x8] sm:$0xff] %v1269
  %1278 = vst [vmem:[%s3 + $0x10] sm:$0xff] %v1270
  %1279 = vst [vmem:[%s3 + $0x18] sm:$0xff] %v1271
  %1280 = vst [vmem:[%s3 + $0x20] sm:$0xff] %v1272
  %1281 = vst [vmem:[%s3 + $0x28] sm:$0xff] %v1273
  %1282 = vst [vmem:[%s3 + $0x30] sm:$0xff] %v1274
  %1283 = vst [vmem:[%s3 + $0x38] sm:$0xff] %v1275
  // Predicated region
  $region14: #{encoder_forward.8} parent=0 // pred_check
    _
  $region15: #{encoder_forward.8} parent=0 // pred_check_branch
    %1285 = sbr.rel (0) target = $region17
  $region16: #{encoder_forward.8} parent=0 // pred_region
    _
  $region17: #{encoder_forward.8} parent=0 // pred_fallthru
    _
  // Predicated region
  $region18: #{encoder_forward.8} parent=0 // pred_check
    _
  $region19: #{encoder_forward.8} parent=0 // pred_check_branch
    %1287 = sbr.rel (0) target = $region21
  $region20: #{encoder_forward.8} parent=0 // pred_region
    _
  $region21: #{encoder_forward.8} parent=0 // pred_fallthru
    _

// kernel: encoder_forward.9
$region0: #{encoder_forward.9}
  #allocation0 [shape = 'u32[]', space=smem, size = 0x4, offset = 0x4, fixed_abs, tag = 'smem constant byte address 0x4 - core index']
  #allocation1 [shape = 'u32[144,128]{1,0:T(1,128)}', space=vmem, size = 0x12000, scoped, tag = 'internal scratch']
  %s0 = inlined_call_operand.vmem [shape: bf16[2,4096], index: 0, kind: input, shape index: {}]
  %s1 = inlined_call_operand.vmem [shape: bf16[4096,64], index: 1, kind: input, shape index: {}]
  %s2 = inlined_call_operand.vmem [shape: f32[1,64], index: 2, kind: input, shape index: {}]
  %s3 = inlined_call_operand.vmem [shape: f32[2,64], index: 3, kind: output, shape index: {}]
  %s4 = sld [smem:[#allocation0]]
  $region22: #{encoder_forward.9} parent=0
    _
  %s6 = ssub.s32 1, %s4
  %s7 = scalar_select 0, %s6, %s4
  // Predicated region
  $region2: #{encoder_forward.9} parent=0 // pred_check
    _
  $region3: #{encoder_forward.9} parent=0 // pred_check_branch
    %9 = sbr.rel (0) target = $region5
  $region4: #{encoder_forward.9} parent=0 // pred_region
    _
  $region5: #{encoder_forward.9} parent=0 // pred_fallthru
    _
  // Predicated region
  $region6: #{encoder_forward.9} parent=0 // pred_check
    _
  $region7: #{encoder_forward.9} parent=0 // pred_check_branch
    %11 = sbr.rel (0) target = $region9
  $region8: #{encoder_forward.9} parent=0 // pred_region
    _
  $region9: #{encoder_forward.9} parent=0 // pred_fallthru
    _
  // Predicated region
  $region10: #{encoder_forward.9} parent=0 // pred_check
    _
  $region11: #{encoder_forward.9} parent=0 // pred_check_branch
    %13 = sbr.rel (0) target = $region13
  $region12: #{encoder_forward.9} parent=0 // pred_region
    _
  $region13: #{encoder_forward.9} parent=0 // pred_fallthru
    _
  %v15 = vld [vmem:[%s0] sm:$0xff]
  %v16 = vld [vmem:[%s0 + $0x8] sm:$0xff]
  %v17 = vld [vmem:[%s0 + $0x10] sm:$0xff]
  %v18 = vld [vmem:[%s0 + $0x18] sm:$0xff]
  %v19 = vld [vmem:[%s1] sm:$0xf]
  %v20 = vld [vmem:[%s1 + $0x4] sm:$0xf]
  %v21 = vld [vmem:[%s1 + $0x8] sm:$0xf]
  %v22 = vld [vmem:[%s1 + $0xc] sm:$0xf]
  %v23 = vld [vmem:[%s1 + $0x10] sm:$0xf]
  %v24 = vld [vmem:[%s1 + $0x14] sm:$0xf]
  %v25 = vld [vmem:[%s1 + $0x18] sm:$0xf]
  %v26 = vld [vmem:[%s1 + $0x1c] sm:$0xf]
  %v27 = vld [vmem:[%s1 + $0x20] sm:$0xf]
  %v28 = vld [vmem:[%s1 + $0x24] sm:$0xf]
  %v29 = vld [vmem:[%s1 + $0x28] sm:$0xf]
  %v30 = vld [vmem:[%s1 + $0x2c] sm:$0xf]
  %v31 = vld [vmem:[%s1 + $0x30] sm:$0xf]
  %v32 = vld [vmem:[%s1 + $0x34] sm:$0xf]
  %v33 = vld [vmem:[%s1 + $0x38] sm:$0xf]
  %v34 = vld [vmem:[%s1 + $0x3c] sm:$0xf]
  %v35 = vld [vmem:[%s1 + $0x40] sm:$0xf]
  %v36 = vld [vmem:[%s1 + $0x44] sm:$0xf]
  %v37 = vld [vmem:[%s1 + $0x48] sm:$0xf]
  %v38 = vld [vmem:[%s1 + $0x4c] sm:$0xf]
  %v39 = vld [vmem:[%s1 + $0x50] sm:$0xf]
  %v40 = vld [vmem:[%s1 + $0x54] sm:$0xf]
  %v41 = vld [vmem:[%s1 + $0x58] sm:$0xf]
  %v42 = vld [vmem:[%s1 + $0x5c] sm:$0xf]
  %v43 = vld [vmem:[%s1 + $0x60] sm:$0xf]
  %v44 = vld [vmem:[%s1 + $0x64] sm:$0xf]
  %v45 = vld [vmem:[%s1 + $0x68] sm:$0xf]
  %v46 = vld [vmem:[%s1 + $0x6c] sm:$0xf]
  %v47 = vld [vmem:[%s1 + $0x70] sm:$0xf]
  %v48 = vld [vmem:[%s1 + $0x74] sm:$0xf]
  %v49 = vld [vmem:[%s1 + $0x78] sm:$0xf]
  %v50 = vld [vmem:[%s1 + $0x7c] sm:$0xf]
  %v51 = vld [vmem:[%s1 + $0x80] sm:$0xf]
  %v52 = vld [vmem:[%s1 + $0x84] sm:$0xf]
  %v53 = vld [vmem:[%s1 + $0x88] sm:$0xf]
  %v54 = vld [vmem:[%s1 + $0x8c] sm:$0xf]
  %v55 = vld [vmem:[%s1 + $0x90] sm:$0xf]
  %v56 = vld [vmem:[%s1 + $0x94] sm:$0xf]
  %v57 = vld [vmem:[%s1 + $0x98] sm:$0xf]
  %v58 = vld [vmem:[%s1 + $0x9c] sm:$0xf]
  %v59 = vld [vmem:[%s1 + $0xa0] sm:$0xf]
  %v60 = vld [vmem:[%s1 + $0xa4] sm:$0xf]
  %v61 = vld [vmem:[%s1 + $0xa8] sm:$0xf]
  %v62 = vld [vmem:[%s1 + $0xac] sm:$0xf]
  %v63 = vld [vmem:[%s1 + $0xb0] sm:$0xf]
  %v64 = vld [vmem:[%s1 + $0xb4] sm:$0xf]
  %v65 = vld [vmem:[%s1 + $0xb8] sm:$0xf]
  %v66 = vld [vmem:[%s1 + $0xbc] sm:$0xf]
  %v67 = vld [vmem:[%s1 + $0xc0] sm:$0xf]
  %v68 = vld [vmem:[%s1 + $0xc4] sm:$0xf]
  %v69 = vld [vmem:[%s1 + $0xc8] sm:$0xf]
  %v70 = vld [vmem:[%s1 + $0xcc] sm:$0xf]
  %v71 = vld [vmem:[%s1 + $0xd0] sm:$0xf]
  %v72 = vld [vmem:[%s1 + $0xd4] sm:$0xf]
  %v73 = vld [vmem:[%s1 + $0xd8] sm:$0xf]
  %v74 = vld [vmem:[%s1 + $0xdc] sm:$0xf]
  %v75 = vld [vmem:[%s1 + $0xe0] sm:$0xf]
  %v76 = vld [vmem:[%s1 + $0xe4] sm:$0xf]
  %v77 = vld [vmem:[%s1 + $0xe8] sm:$0xf]
  %v78 = vld [vmem:[%s1 + $0xec] sm:$0xf]
  %v79 = vld [vmem:[%s1 + $0xf0] sm:$0xf]
  %v80 = vld [vmem:[%s1 + $0xf4] sm:$0xf]
  %v81 = vld [vmem:[%s1 + $0xf8] sm:$0xf]
  %v82 = vld [vmem:[%s1 + $0xfc] sm:$0xf]
  %v83 = vld [vmem:[%s1 + $0x100] sm:$0xf]
  %v84 = vld [vmem:[%s1 + $0x104] sm:$0xf]
  %v85 = vld [vmem:[%s1 + $0x108] sm:$0xf]
  %v86 = vld [vmem:[%s1 + $0x10c] sm:$0xf]
  %v87 = vld [vmem:[%s1 + $0x110] sm:$0xf]
  %v88 = vld [vmem:[%s1 + $0x114] sm:$0xf]
  %v89 = vld [vmem:[%s1 + $0x118] sm:$0xf]
  %v90 = vld [vmem:[%s1 + $0x11c] sm:$0xf]
  %v91 = vld [vmem:[%s1 + $0x120] sm:$0xf]
  %v92 = vld [vmem:[%s1 + $0x124] sm:$0xf]
  %v93 = vld [vmem:[%s1 + $0x128] sm:$0xf]
  %v94 = vld [vmem:[%s1 + $0x12c] sm:$0xf]
  %v95 = vld [vmem:[%s1 + $0x130] sm:$0xf]
  %v96 = vld [vmem:[%s1 + $0x134] sm:$0xf]
  %v97 = vld [vmem:[%s1 + $0x138] sm:$0xf]
  %v98 = vld [vmem:[%s1 + $0x13c] sm:$0xf]
  %v99 = vld [vmem:[%s1 + $0x140] sm:$0xf]
  %v100 = vld [vmem:[%s1 + $0x144] sm:$0xf]
  %v101 = vld [vmem:[%s1 + $0x148] sm:$0xf]
  %v102 = vld [vmem:[%s1 + $0x14c] sm:$0xf]
  %v103 = vld [vmem:[%s1 + $0x150] sm:$0xf]
  %v104 = vld [vmem:[%s1 + $0x154] sm:$0xf]
  %v105 = vld [vmem:[%s1 + $0x158] sm:$0xf]
  %v106 = vld [vmem:[%s1 + $0x15c] sm:$0xf]
  %v107 = vld [vmem:[%s1 + $0x160] sm:$0xf]
  %v108 = vld [vmem:[%s1 + $0x164] sm:$0xf]
  %v109 = vld [vmem:[%s1 + $0x168] sm:$0xf]
  %v110 = vld [vmem:[%s1 + $0x16c] sm:$0xf]
  %v111 = vld [vmem:[%s1 + $0x170] sm:$0xf]
  %v112 = vld [vmem:[%s1 + $0x174] sm:$0xf]
  %v113 = vld [vmem:[%s1 + $0x178] sm:$0xf]
  %v114 = vld [vmem:[%s1 + $0x17c] sm:$0xf]
  %v115 = vld [vmem:[%s1 + $0x180] sm:$0xf]
  %v116 = vld [vmem:[%s1 + $0x184] sm:$0xf]
  %v117 = vld [vmem:[%s1 + $0x188] sm:$0xf]
  %v118 = vld [vmem:[%s1 + $0x18c] sm:$0xf]
  %v119 = vld [vmem:[%s1 + $0x190] sm:$0xf]
  %v120 = vld [vmem:[%s1 + $0x194] sm:$0xf]
  %v121 = vld [vmem:[%s1 + $0x198] sm:$0xf]
  %v122 = vld [vmem:[%s1 + $0x19c] sm:$0xf]
  %v123 = vld [vmem:[%s1 + $0x1a0] sm:$0xf]
  %v124 = vld [vmem:[%s1 + $0x1a4] sm:$0xf]
  %v125 = vld [vmem:[%s1 + $0x1a8] sm:$0xf]
  %v126 = vld [vmem:[%s1 + $0x1ac] sm:$0xf]
  %v127 = vld [vmem:[%s1 + $0x1b0] sm:$0xf]
  %v128 = vld [vmem:[%s1 + $0x1b4] sm:$0xf]
  %v129 = vld [vmem:[%s1 + $0x1b8] sm:$0xf]
  %v130 = vld [vmem:[%s1 + $0x1bc] sm:$0xf]
  %v131 = vld [vmem:[%s1 + $0x1c0] sm:$0xf]
  %v132 = vld [vmem:[%s1 + $0x1c4] sm:$0xf]
  %v133 = vld [vmem:[%s1 + $0x1c8] sm:$0xf]
  %v134 = vld [vmem:[%s1 + $0x1cc] sm:$0xf]
  %v135 = vld [vmem:[%s1 + $0x1d0] sm:$0xf]
  %v136 = vld [vmem:[%s1 + $0x1d4] sm:$0xf]
  %v137 = vld [vmem:[%s1 + $0x1d8] sm:$0xf]
  %v138 = vld [vmem:[%s1 + $0x1dc] sm:$0xf]
  %v139 = vld [vmem:[%s1 + $0x1e0] sm:$0xf]
  %v140 = vld [vmem:[%s1 + $0x1e4] sm:$0xf]
  %v141 = vld [vmem:[%s1 + $0x1e8] sm:$0xf]
  %v142 = vld [vmem:[%s1 + $0x1ec] sm:$0xf]
  %v143 = vld [vmem:[%s1 + $0x1f0] sm:$0xf]
  %v144 = vld [vmem:[%s1 + $0x1f4] sm:$0xf]
  %v145 = vld [vmem:[%s1 + $0x1f8] sm:$0xf]
  %v146 = vld [vmem:[%s1 + $0x1fc] sm:$0xf]
  %v147 = vld [vmem:[%s1 + $0x200] sm:$0xf]
  %v148 = vld [vmem:[%s1 + $0x204] sm:$0xf]
  %v149 = vld [vmem:[%s1 + $0x208] sm:$0xf]
  %v150 = vld [vmem:[%s1 + $0x20c] sm:$0xf]
  %v151 = vld [vmem:[%s1 + $0x210] sm:$0xf]
  %v152 = vld [vmem:[%s1 + $0x214] sm:$0xf]
  %v153 = vld [vmem:[%s1 + $0x218] sm:$0xf]
  %v154 = vld [vmem:[%s1 + $0x21c] sm:$0xf]
  %v155 = vld [vmem:[%s1 + $0x220] sm:$0xf]
  %v156 = vld [vmem:[%s1 + $0x224] sm:$0xf]
  %v157 = vld [vmem:[%s1 + $0x228] sm:$0xf]
  %v158 = vld [vmem:[%s1 + $0x22c] sm:$0xf]
  %v159 = vld [vmem:[%s1 + $0x230] sm:$0xf]
  %v160 = vld [vmem:[%s1 + $0x234] sm:$0xf]
  %v161 = vld [vmem:[%s1 + $0x238] sm:$0xf]
  %v162 = vld [vmem:[%s1 + $0x23c] sm:$0xf]
  %v163 = vld [vmem:[%s1 + $0x240] sm:$0xf]
  %v164 = vld [vmem:[%s1 + $0x244] sm:$0xf]
  %v165 = vld [vmem:[%s1 + $0x248] sm:$0xf]
  %v166 = vld [vmem:[%s1 + $0x24c] sm:$0xf]
  %v167 = vld [vmem:[%s1 + $0x250] sm:$0xf]
  %v168 = vld [vmem:[%s1 + $0x254] sm:$0xf]
  %v169 = vld [vmem:[%s1 + $0x258] sm:$0xf]
  %v170 = vld [vmem:[%s1 + $0x25c] sm:$0xf]
  %v171 = vld [vmem:[%s1 + $0x260] sm:$0xf]
  %v172 = vld [vmem:[%s1 + $0x264] sm:$0xf]
  %v173 = vld [vmem:[%s1 + $0x268] sm:$0xf]
  %v174 = vld [vmem:[%s1 + $0x26c] sm:$0xf]
  %v175 = vld [vmem:[%s1 + $0x270] sm:$0xf]
  %v176 = vld [vmem:[%s1 + $0x274] sm:$0xf]
  %v177 = vld [vmem:[%s1 + $0x278] sm:$0xf]
  %v178 = vld [vmem:[%s1 + $0x27c] sm:$0xf]
  %v179 = vld [vmem:[%s1 + $0x280] sm:$0xf]
  %v180 = vld [vmem:[%s1 + $0x284] sm:$0xf]
  %v181 = vld [vmem:[%s1 + $0x288] sm:$0xf]
  %v182 = vld [vmem:[%s1 + $0x28c] sm:$0xf]
  %v183 = vld [vmem:[%s1 + $0x290] sm:$0xf]
  %v184 = vld [vmem:[%s1 + $0x294] sm:$0xf]
  %v185 = vld [vmem:[%s1 + $0x298] sm:$0xf]
  %v186 = vld [vmem:[%s1 + $0x29c] sm:$0xf]
  %v187 = vld [vmem:[%s1 + $0x2a0] sm:$0xf]
  %v188 = vld [vmem:[%s1 + $0x2a4] sm:$0xf]
  %v189 = vld [vmem:[%s1 + $0x2a8] sm:$0xf]
  %v190 = vld [vmem:[%s1 + $0x2ac] sm:$0xf]
  %v191 = vld [vmem:[%s1 + $0x2b0] sm:$0xf]
  %v192 = vld [vmem:[%s1 + $0x2b4] sm:$0xf]
  %v193 = vld [vmem:[%s1 + $0x2b8] sm:$0xf]
  %v194 = vld [vmem:[%s1 + $0x2bc] sm:$0xf]
  %v195 = vld [vmem:[%s1 + $0x2c0] sm:$0xf]
  %v196 = vld [vmem:[%s1 + $0x2c4] sm:$0xf]
  %v197 = vld [vmem:[%s1 + $0x2c8] sm:$0xf]
  %v198 = vld [vmem:[%s1 + $0x2cc] sm:$0xf]
  %v199 = vld [vmem:[%s1 + $0x2d0] sm:$0xf]
  %v200 = vld [vmem:[%s1 + $0x2d4] sm:$0xf]
  %v201 = vld [vmem:[%s1 + $0x2d8] sm:$0xf]
  %v202 = vld [vmem:[%s1 + $0x2dc] sm:$0xf]
  %v203 = vld [vmem:[%s1 + $0x2e0] sm:$0xf]
  %v204 = vld [vmem:[%s1 + $0x2e4] sm:$0xf]
  %v205 = vld [vmem:[%s1 + $0x2e8] sm:$0xf]
  %v206 = vld [vmem:[%s1 + $0x2ec] sm:$0xf]
  %v207 = vld [vmem:[%s1 + $0x2f0] sm:$0xf]
  %v208 = vld [vmem:[%s1 + $0x2f4] sm:$0xf]
  %v209 = vld [vmem:[%s1 + $0x2f8] sm:$0xf]
  %v210 = vld [vmem:[%s1 + $0x2fc] sm:$0xf]
  %v211 = vld [vmem:[%s1 + $0x300] sm:$0xf]
  %v212 = vld [vmem:[%s1 + $0x304] sm:$0xf]
  %v213 = vld [vmem:[%s1 + $0x308] sm:$0xf]
  %v214 = vld [vmem:[%s1 + $0x30c] sm:$0xf]
  %v215 = vld [vmem:[%s1 + $0x310] sm:$0xf]
  %v216 = vld [vmem:[%s1 + $0x314] sm:$0xf]
  %v217 = vld [vmem:[%s1 + $0x318] sm:$0xf]
  %v218 = vld [vmem:[%s1 + $0x31c] sm:$0xf]
  %v219 = vld [vmem:[%s1 + $0x320] sm:$0xf]
  %v220 = vld [vmem:[%s1 + $0x324] sm:$0xf]
  %v221 = vld [vmem:[%s1 + $0x328] sm:$0xf]
  %v222 = vld [vmem:[%s1 + $0x32c] sm:$0xf]
  %v223 = vld [vmem:[%s1 + $0x330] sm:$0xf]
  %v224 = vld [vmem:[%s1 + $0x334] sm:$0xf]
  %v225 = vld [vmem:[%s1 + $0x338] sm:$0xf]
  %v226 = vld [vmem:[%s1 + $0x33c] sm:$0xf]
  %v227 = vld [vmem:[%s1 + $0x340] sm:$0xf]
  %v228 = vld [vmem:[%s1 + $0x344] sm:$0xf]
  %v229 = vld [vmem:[%s1 + $0x348] sm:$0xf]
  %v230 = vld [vmem:[%s1 + $0x34c] sm:$0xf]
  %v231 = vld [vmem:[%s1 + $0x350] sm:$0xf]
  %v232 = vld [vmem:[%s1 + $0x354] sm:$0xf]
  %v233 = vld [vmem:[%s1 + $0x358] sm:$0xf]
  %v234 = vld [vmem:[%s1 + $0x35c] sm:$0xf]
  %v235 = vld [vmem:[%s1 + $0x360] sm:$0xf]
  %v236 = vld [vmem:[%s1 + $0x364] sm:$0xf]
  %v237 = vld [vmem:[%s1 + $0x368] sm:$0xf]
  %v238 = vld [vmem:[%s1 + $0x36c] sm:$0xf]
  %v239 = vld [vmem:[%s1 + $0x370] sm:$0xf]
  %v240 = vld [vmem:[%s1 + $0x374] sm:$0xf]
  %v241 = vld [vmem:[%s1 + $0x378] sm:$0xf]
  %v242 = vld [vmem:[%s1 + $0x37c] sm:$0xf]
  %v243 = vld [vmem:[%s1 + $0x380] sm:$0xf]
  %v244 = vld [vmem:[%s1 + $0x384] sm:$0xf]
  %v245 = vld [vmem:[%s1 + $0x388] sm:$0xf]
  %v246 = vld [vmem:[%s1 + $0x38c] sm:$0xf]
  %v247 = vld [vmem:[%s1 + $0x390] sm:$0xf]
  %v248 = vld [vmem:[%s1 + $0x394] sm:$0xf]
  %v249 = vld [vmem:[%s1 + $0x398] sm:$0xf]
  %v250 = vld [vmem:[%s1 + $0x39c] sm:$0xf]
  %v251 = vld [vmem:[%s1 + $0x3a0] sm:$0xf]
  %v252 = vld [vmem:[%s1 + $0x3a4] sm:$0xf]
  %v253 = vld [vmem:[%s1 + $0x3a8] sm:$0xf]
  %v254 = vld [vmem:[%s1 + $0x3ac] sm:$0xf]
  %v255 = vld [vmem:[%s1 + $0x3b0] sm:$0xf]
  %v256 = vld [vmem:[%s1 + $0x3b4] sm:$0xf]
  %v257 = vld [vmem:[%s1 + $0x3b8] sm:$0xf]
  %v258 = vld [vmem:[%s1 + $0x3bc] sm:$0xf]
  %v259 = vld [vmem:[%s1 + $0x3c0] sm:$0xf]
  %v260 = vld [vmem:[%s1 + $0x3c4] sm:$0xf]
  %v261 = vld [vmem:[%s1 + $0x3c8] sm:$0xf]
  %v262 = vld [vmem:[%s1 + $0x3cc] sm:$0xf]
  %v263 = vld [vmem:[%s1 + $0x3d0] sm:$0xf]
  %v264 = vld [vmem:[%s1 + $0x3d4] sm:$0xf]
  %v265 = vld [vmem:[%s1 + $0x3d8] sm:$0xf]
  %v266 = vld [vmem:[%s1 + $0x3dc] sm:$0xf]
  %v267 = vld [vmem:[%s1 + $0x3e0] sm:$0xf]
  %v268 = vld [vmem:[%s1 + $0x3e4] sm:$0xf]
  %v269 = vld [vmem:[%s1 + $0x3e8] sm:$0xf]
  %v270 = vld [vmem:[%s1 + $0x3ec] sm:$0xf]
  %v271 = vld [vmem:[%s1 + $0x3f0] sm:$0xf]
  %v272 = vld [vmem:[%s1 + $0x3f4] sm:$0xf]
  %v273 = vld [vmem:[%s1 + $0x3f8] sm:$0xf]
  %v274 = vld [vmem:[%s1 + $0x3fc] sm:$0xf]
  %v275 = vld [vmem:[%s1 + $0x400] sm:$0xf]
  %v276 = vld [vmem:[%s1 + $0x404] sm:$0xf]
  %v277 = vld [vmem:[%s1 + $0x408] sm:$0xf]
  %v278 = vld [vmem:[%s1 + $0x40c] sm:$0xf]
  %v279 = vld [vmem:[%s1 + $0x410] sm:$0xf]
  %v280 = vld [vmem:[%s1 + $0x414] sm:$0xf]
  %v281 = vld [vmem:[%s1 + $0x418] sm:$0xf]
  %v282 = vld [vmem:[%s1 + $0x41c] sm:$0xf]
  %v283 = vld [vmem:[%s1 + $0x420] sm:$0xf]
  %v284 = vld [vmem:[%s1 + $0x424] sm:$0xf]
  %v285 = vld [vmem:[%s1 + $0x428] sm:$0xf]
  %v286 = vld [vmem:[%s1 + $0x42c] sm:$0xf]
  %v287 = vld [vmem:[%s1 + $0x430] sm:$0xf]
  %v288 = vld [vmem:[%s1 + $0x434] sm:$0xf]
  %v289 = vld [vmem:[%s1 + $0x438] sm:$0xf]
  %v290 = vld [vmem:[%s1 + $0x43c] sm:$0xf]
  %v291 = vld [vmem:[%s1 + $0x440] sm:$0xf]
  %v292 = vld [vmem:[%s1 + $0x444] sm:$0xf]
  %v293 = vld [vmem:[%s1 + $0x448] sm:$0xf]
  %v294 = vld [vmem:[%s1 + $0x44c] sm:$0xf]
  %v295 = vld [vmem:[%s1 + $0x450] sm:$0xf]
  %v296 = vld [vmem:[%s1 + $0x454] sm:$0xf]
  %v297 = vld [vmem:[%s1 + $0x458] sm:$0xf]
  %v298 = vld [vmem:[%s1 + $0x45c] sm:$0xf]
  %v299 = vld [vmem:[%s1 + $0x460] sm:$0xf]
  %v300 = vld [vmem:[%s1 + $0x464] sm:$0xf]
  %v301 = vld [vmem:[%s1 + $0x468] sm:$0xf]
  %v302 = vld [vmem:[%s1 + $0x46c] sm:$0xf]
  %v303 = vld [vmem:[%s1 + $0x470] sm:$0xf]
  %v304 = vld [vmem:[%s1 + $0x474] sm:$0xf]
  %v305 = vld [vmem:[%s1 + $0x478] sm:$0xf]
  %v306 = vld [vmem:[%s1 + $0x47c] sm:$0xf]
  %v307 = vld [vmem:[%s1 + $0x480] sm:$0xf]
  %v308 = vld [vmem:[%s1 + $0x484] sm:$0xf]
  %v309 = vld [vmem:[%s1 + $0x488] sm:$0xf]
  %v310 = vld [vmem:[%s1 + $0x48c] sm:$0xf]
  %v311 = vld [vmem:[%s1 + $0x490] sm:$0xf]
  %v312 = vld [vmem:[%s1 + $0x494] sm:$0xf]
  %v313 = vld [vmem:[%s1 + $0x498] sm:$0xf]
  %v314 = vld [vmem:[%s1 + $0x49c] sm:$0xf]
  %v315 = vld [vmem:[%s1 + $0x4a0] sm:$0xf]
  %v316 = vld [vmem:[%s1 + $0x4a4] sm:$0xf]
  %v317 = vld [vmem:[%s1 + $0x4a8] sm:$0xf]
  %v318 = vld [vmem:[%s1 + $0x4ac] sm:$0xf]
  %v319 = vld [vmem:[%s1 + $0x4b0] sm:$0xf]
  %v320 = vld [vmem:[%s1 + $0x4b4] sm:$0xf]
  %v321 = vld [vmem:[%s1 + $0x4b8] sm:$0xf]
  %v322 = vld [vmem:[%s1 + $0x4bc] sm:$0xf]
  %v323 = vld [vmem:[%s1 + $0x4c0] sm:$0xf]
  %v324 = vld [vmem:[%s1 + $0x4c4] sm:$0xf]
  %v325 = vld [vmem:[%s1 + $0x4c8] sm:$0xf]
  %v326 = vld [vmem:[%s1 + $0x4cc] sm:$0xf]
  %v327 = vld [vmem:[%s1 + $0x4d0] sm:$0xf]
  %v328 = vld [vmem:[%s1 + $0x4d4] sm:$0xf]
  %v329 = vld [vmem:[%s1 + $0x4d8] sm:$0xf]
  %v330 = vld [vmem:[%s1 + $0x4dc] sm:$0xf]
  %v331 = vld [vmem:[%s1 + $0x4e0] sm:$0xf]
  %v332 = vld [vmem:[%s1 + $0x4e4] sm:$0xf]
  %v333 = vld [vmem:[%s1 + $0x4e8] sm:$0xf]
  %v334 = vld [vmem:[%s1 + $0x4ec] sm:$0xf]
  %v335 = vld [vmem:[%s1 + $0x4f0] sm:$0xf]
  %v336 = vld [vmem:[%s1 + $0x4f4] sm:$0xf]
  %v337 = vld [vmem:[%s1 + $0x4f8] sm:$0xf]
  %v338 = vld [vmem:[%s1 + $0x4fc] sm:$0xf]
  %v339 = vld [vmem:[%s1 + $0x500] sm:$0xf]
  %v340 = vld [vmem:[%s1 + $0x504] sm:$0xf]
  %v341 = vld [vmem:[%s1 + $0x508] sm:$0xf]
  %v342 = vld [vmem:[%s1 + $0x50c] sm:$0xf]
  %v343 = vld [vmem:[%s1 + $0x510] sm:$0xf]
  %v344 = vld [vmem:[%s1 + $0x514] sm:$0xf]
  %v345 = vld [vmem:[%s1 + $0x518] sm:$0xf]
  %v346 = vld [vmem:[%s1 + $0x51c] sm:$0xf]
  %v347 = vld [vmem:[%s1 + $0x520] sm:$0xf]
  %v348 = vld [vmem:[%s1 + $0x524] sm:$0xf]
  %v349 = vld [vmem:[%s1 + $0x528] sm:$0xf]
  %v350 = vld [vmem:[%s1 + $0x52c] sm:$0xf]
  %v351 = vld [vmem:[%s1 + $0x530] sm:$0xf]
  %v352 = vld [vmem:[%s1 + $0x534] sm:$0xf]
  %v353 = vld [vmem:[%s1 + $0x538] sm:$0xf]
  %v354 = vld [vmem:[%s1 + $0x53c] sm:$0xf]
  %v355 = vld [vmem:[%s1 + $0x540] sm:$0xf]
  %v356 = vld [vmem:[%s1 + $0x544] sm:$0xf]
  %v357 = vld [vmem:[%s1 + $0x548] sm:$0xf]
  %v358 = vld [vmem:[%s1 + $0x54c] sm:$0xf]
  %v359 = vld [vmem:[%s1 + $0x550] sm:$0xf]
  %v360 = vld [vmem:[%s1 + $0x554] sm:$0xf]
  %v361 = vld [vmem:[%s1 + $0x558] sm:$0xf]
  %v362 = vld [vmem:[%s1 + $0x55c] sm:$0xf]
  %v363 = vld [vmem:[%s1 + $0x560] sm:$0xf]
  %v364 = vld [vmem:[%s1 + $0x564] sm:$0xf]
  %v365 = vld [vmem:[%s1 + $0x568] sm:$0xf]
  %v366 = vld [vmem:[%s1 + $0x56c] sm:$0xf]
  %v367 = vld [vmem:[%s1 + $0x570] sm:$0xf]
  %v368 = vld [vmem:[%s1 + $0x574] sm:$0xf]
  %v369 = vld [vmem:[%s1 + $0x578] sm:$0xf]
  %v370 = vld [vmem:[%s1 + $0x57c] sm:$0xf]
  %v371 = vld [vmem:[%s1 + $0x580] sm:$0xf]
  %v372 = vld [vmem:[%s1 + $0x584] sm:$0xf]
  %v373 = vld [vmem:[%s1 + $0x588] sm:$0xf]
  %v374 = vld [vmem:[%s1 + $0x58c] sm:$0xf]
  %v375 = vld [vmem:[%s1 + $0x590] sm:$0xf]
  %v376 = vld [vmem:[%s1 + $0x594] sm:$0xf]
  %v377 = vld [vmem:[%s1 + $0x598] sm:$0xf]
  %v378 = vld [vmem:[%s1 + $0x59c] sm:$0xf]
  %v379 = vld [vmem:[%s1 + $0x5a0] sm:$0xf]
  %v380 = vld [vmem:[%s1 + $0x5a4] sm:$0xf]
  %v381 = vld [vmem:[%s1 + $0x5a8] sm:$0xf]
  %v382 = vld [vmem:[%s1 + $0x5ac] sm:$0xf]
  %v383 = vld [vmem:[%s1 + $0x5b0] sm:$0xf]
  %v384 = vld [vmem:[%s1 + $0x5b4] sm:$0xf]
  %v385 = vld [vmem:[%s1 + $0x5b8] sm:$0xf]
  %v386 = vld [vmem:[%s1 + $0x5bc] sm:$0xf]
  %v387 = vld [vmem:[%s1 + $0x5c0] sm:$0xf]
  %v388 = vld [vmem:[%s1 + $0x5c4] sm:$0xf]
  %v389 = vld [vmem:[%s1 + $0x5c8] sm:$0xf]
  %v390 = vld [vmem:[%s1 + $0x5cc] sm:$0xf]
  %v391 = vld [vmem:[%s1 + $0x5d0] sm:$0xf]
  %v392 = vld [vmem:[%s1 + $0x5d4] sm:$0xf]
  %v393 = vld [vmem:[%s1 + $0x5d8] sm:$0xf]
  %v394 = vld [vmem:[%s1 + $0x5dc] sm:$0xf]
  %v395 = vld [vmem:[%s1 + $0x5e0] sm:$0xf]
  %v396 = vld [vmem:[%s1 + $0x5e4] sm:$0xf]
  %v397 = vld [vmem:[%s1 + $0x5e8] sm:$0xf]
  %v398 = vld [vmem:[%s1 + $0x5ec] sm:$0xf]
  %v399 = vld [vmem:[%s1 + $0x5f0] sm:$0xf]
  %v400 = vld [vmem:[%s1 + $0x5f4] sm:$0xf]
  %v401 = vld [vmem:[%s1 + $0x5f8] sm:$0xf]
  %v402 = vld [vmem:[%s1 + $0x5fc] sm:$0xf]
  %v403 = vld [vmem:[%s1 + $0x600] sm:$0xf]
  %v404 = vld [vmem:[%s1 + $0x604] sm:$0xf]
  %v405 = vld [vmem:[%s1 + $0x608] sm:$0xf]
  %v406 = vld [vmem:[%s1 + $0x60c] sm:$0xf]
  %v407 = vld [vmem:[%s1 + $0x610] sm:$0xf]
  %v408 = vld [vmem:[%s1 + $0x614] sm:$0xf]
  %v409 = vld [vmem:[%s1 + $0x618] sm:$0xf]
  %v410 = vld [vmem:[%s1 + $0x61c] sm:$0xf]
  %v411 = vld [vmem:[%s1 + $0x620] sm:$0xf]
  %v412 = vld [vmem:[%s1 + $0x624] sm:$0xf]
  %v413 = vld [vmem:[%s1 + $0x628] sm:$0xf]
  %v414 = vld [vmem:[%s1 + $0x62c] sm:$0xf]
  %v415 = vld [vmem:[%s1 + $0x630] sm:$0xf]
  %v416 = vld [vmem:[%s1 + $0x634] sm:$0xf]
  %v417 = vld [vmem:[%s1 + $0x638] sm:$0xf]
  %v418 = vld [vmem:[%s1 + $0x63c] sm:$0xf]
  %v419 = vld [vmem:[%s1 + $0x640] sm:$0xf]
  %v420 = vld [vmem:[%s1 + $0x644] sm:$0xf]
  %v421 = vld [vmem:[%s1 + $0x648] sm:$0xf]
  %v422 = vld [vmem:[%s1 + $0x64c] sm:$0xf]
  %v423 = vld [vmem:[%s1 + $0x650] sm:$0xf]
  %v424 = vld [vmem:[%s1 + $0x654] sm:$0xf]
  %v425 = vld [vmem:[%s1 + $0x658] sm:$0xf]
  %v426 = vld [vmem:[%s1 + $0x65c] sm:$0xf]
  %v427 = vld [vmem:[%s1 + $0x660] sm:$0xf]
  %v428 = vld [vmem:[%s1 + $0x664] sm:$0xf]
  %v429 = vld [vmem:[%s1 + $0x668] sm:$0xf]
  %v430 = vld [vmem:[%s1 + $0x66c] sm:$0xf]
  %v431 = vld [vmem:[%s1 + $0x670] sm:$0xf]
  %v432 = vld [vmem:[%s1 + $0x674] sm:$0xf]
  %v433 = vld [vmem:[%s1 + $0x678] sm:$0xf]
  %v434 = vld [vmem:[%s1 + $0x67c] sm:$0xf]
  %v435 = vld [vmem:[%s1 + $0x680] sm:$0xf]
  %v436 = vld [vmem:[%s1 + $0x684] sm:$0xf]
  %v437 = vld [vmem:[%s1 + $0x688] sm:$0xf]
  %v438 = vld [vmem:[%s1 + $0x68c] sm:$0xf]
  %v439 = vld [vmem:[%s1 + $0x690] sm:$0xf]
  %v440 = vld [vmem:[%s1 + $0x694] sm:$0xf]
  %v441 = vld [vmem:[%s1 + $0x698] sm:$0xf]
  %v442 = vld [vmem:[%s1 + $0x69c] sm:$0xf]
  %v443 = vld [vmem:[%s1 + $0x6a0] sm:$0xf]
  %v444 = vld [vmem:[%s1 + $0x6a4] sm:$0xf]
  %v445 = vld [vmem:[%s1 + $0x6a8] sm:$0xf]
  %v446 = vld [vmem:[%s1 + $0x6ac] sm:$0xf]
  %v447 = vld [vmem:[%s1 + $0x6b0] sm:$0xf]
  %v448 = vld [vmem:[%s1 + $0x6b4] sm:$0xf]
  %v449 = vld [vmem:[%s1 + $0x6b8] sm:$0xf]
  %v450 = vld [vmem:[%s1 + $0x6bc] sm:$0xf]
  %v451 = vld [vmem:[%s1 + $0x6c0] sm:$0xf]
  %v452 = vld [vmem:[%s1 + $0x6c4] sm:$0xf]
  %v453 = vld [vmem:[%s1 + $0x6c8] sm:$0xf]
  %v454 = vld [vmem:[%s1 + $0x6cc] sm:$0xf]
  %v455 = vld [vmem:[%s1 + $0x6d0] sm:$0xf]
  %v456 = vld [vmem:[%s1 + $0x6d4] sm:$0xf]
  %v457 = vld [vmem:[%s1 + $0x6d8] sm:$0xf]
  %v458 = vld [vmem:[%s1 + $0x6dc] sm:$0xf]
  %v459 = vld [vmem:[%s1 + $0x6e0] sm:$0xf]
  %v460 = vld [vmem:[%s1 + $0x6e4] sm:$0xf]
  %v461 = vld [vmem:[%s1 + $0x6e8] sm:$0xf]
  %v462 = vld [vmem:[%s1 + $0x6ec] sm:$0xf]
  %v463 = vld [vmem:[%s1 + $0x6f0] sm:$0xf]
  %v464 = vld [vmem:[%s1 + $0x6f4] sm:$0xf]
  %v465 = vld [vmem:[%s1 + $0x6f8] sm:$0xf]
  %v466 = vld [vmem:[%s1 + $0x6fc] sm:$0xf]
  %v467 = vld [vmem:[%s1 + $0x700] sm:$0xf]
  %v468 = vld [vmem:[%s1 + $0x704] sm:$0xf]
  %v469 = vld [vmem:[%s1 + $0x708] sm:$0xf]
  %v470 = vld [vmem:[%s1 + $0x70c] sm:$0xf]
  %v471 = vld [vmem:[%s1 + $0x710] sm:$0xf]
  %v472 = vld [vmem:[%s1 + $0x714] sm:$0xf]
  %v473 = vld [vmem:[%s1 + $0x718] sm:$0xf]
  %v474 = vld [vmem:[%s1 + $0x71c] sm:$0xf]
  %v475 = vld [vmem:[%s1 + $0x720] sm:$0xf]
  %v476 = vld [vmem:[%s1 + $0x724] sm:$0xf]
  %v477 = vld [vmem:[%s1 + $0x728] sm:$0xf]
  %v478 = vld [vmem:[%s1 + $0x72c] sm:$0xf]
  %v479 = vld [vmem:[%s1 + $0x730] sm:$0xf]
  %v480 = vld [vmem:[%s1 + $0x734] sm:$0xf]
  %v481 = vld [vmem:[%s1 + $0x738] sm:$0xf]
  %v482 = vld [vmem:[%s1 + $0x73c] sm:$0xf]
  %v483 = vld [vmem:[%s1 + $0x740] sm:$0xf]
  %v484 = vld [vmem:[%s1 + $0x744] sm:$0xf]
  %v485 = vld [vmem:[%s1 + $0x748] sm:$0xf]
  %v486 = vld [vmem:[%s1 + $0x74c] sm:$0xf]
  %v487 = vld [vmem:[%s1 + $0x750] sm:$0xf]
  %v488 = vld [vmem:[%s1 + $0x754] sm:$0xf]
  %v489 = vld [vmem:[%s1 + $0x758] sm:$0xf]
  %v490 = vld [vmem:[%s1 + $0x75c] sm:$0xf]
  %v491 = vld [vmem:[%s1 + $0x760] sm:$0xf]
  %v492 = vld [vmem:[%s1 + $0x764] sm:$0xf]
  %v493 = vld [vmem:[%s1 + $0x768] sm:$0xf]
  %v494 = vld [vmem:[%s1 + $0x76c] sm:$0xf]
  %v495 = vld [vmem:[%s1 + $0x770] sm:$0xf]
  %v496 = vld [vmem:[%s1 + $0x774] sm:$0xf]
  %v497 = vld [vmem:[%s1 + $0x778] sm:$0xf]
  %v498 = vld [vmem:[%s1 + $0x77c] sm:$0xf]
  %v499 = vld [vmem:[%s1 + $0x780] sm:$0xf]
  %v500 = vld [vmem:[%s1 + $0x784] sm:$0xf]
  %v501 = vld [vmem:[%s1 + $0x788] sm:$0xf]
  %v502 = vld [vmem:[%s1 + $0x78c] sm:$0xf]
  %v503 = vld [vmem:[%s1 + $0x790] sm:$0xf]
  %v504 = vld [vmem:[%s1 + $0x794] sm:$0xf]
  %v505 = vld [vmem:[%s1 + $0x798] sm:$0xf]
  %v506 = vld [vmem:[%s1 + $0x79c] sm:$0xf]
  %v507 = vld [vmem:[%s1 + $0x7a0] sm:$0xf]
  %v508 = vld [vmem:[%s1 + $0x7a4] sm:$0xf]
  %v509 = vld [vmem:[%s1 + $0x7a8] sm:$0xf]
  %v510 = vld [vmem:[%s1 + $0x7ac] sm:$0xf]
  %v511 = vld [vmem:[%s1 + $0x7b0] sm:$0xf]
  %v512 = vld [vmem:[%s1 + $0x7b4] sm:$0xf]
  %v513 = vld [vmem:[%s1 + $0x7b8] sm:$0xf]
  %v514 = vld [vmem:[%s1 + $0x7bc] sm:$0xf]
  %v515 = vld [vmem:[%s1 + $0x7c0] sm:$0xf]
  %v516 = vld [vmem:[%s1 + $0x7c4] sm:$0xf]
  %v517 = vld [vmem:[%s1 + $0x7c8] sm:$0xf]
  %v518 = vld [vmem:[%s1 + $0x7cc] sm:$0xf]
  %v519 = vld [vmem:[%s1 + $0x7d0] sm:$0xf]
  %v520 = vld [vmem:[%s1 + $0x7d4] sm:$0xf]
  %v521 = vld [vmem:[%s1 + $0x7d8] sm:$0xf]
  %v522 = vld [vmem:[%s1 + $0x7dc] sm:$0xf]
  %v523 = vld [vmem:[%s1 + $0x7e0] sm:$0xf]
  %v524 = vld [vmem:[%s1 + $0x7e4] sm:$0xf]
  %v525 = vld [vmem:[%s1 + $0x7e8] sm:$0xf]
  %v526 = vld [vmem:[%s1 + $0x7ec] sm:$0xf]
  %v527 = vld [vmem:[%s1 + $0x7f0] sm:$0xf]
  %v528 = vld [vmem:[%s1 + $0x7f4] sm:$0xf]
  %v529 = vld [vmem:[%s1 + $0x7f8] sm:$0xf]
  %v530 = vld [vmem:[%s1 + $0x7fc] sm:$0xf]
  %v531 = vld [vmem:[%s2] sm:$0x1]
  %v533 = vlaneseq
  %v534 = vshrl.u32 %v533, 7
  %v535 = vsub.s32 0, %v534
  %v536 = vrot.slane %v531, %v535
  %v542 = vcombine.high %v15, %v15
  %v544 = vunpack.c.l.s4 1966171168
  %v545 = vunpack.c.0.s8 %v544
  %v546 = vlaneseq
  %v547 = vshrl.u32 %v546, 7
  %v548 = vsub.s32 %v545, %v547
  %v549 = vrot.slane %v15, %v548
  %v551 = vunpack.c.l.s4 1966171168
  %v552 = vunpack.c.0.s8 %v551
  %v553 = vlaneseq
  %v554 = vshrl.u32 %v553, 7
  %v555 = vsub.s32 %v552, %v554
  %v556 = vrot.slane %v542, %v555
  %v557 = vcombine.high %v549, %v549
  %v558 = vcombine.high %v556, %v556
  %v560 = vunpack.c.l.s4 1966171168
  %v561 = vunpack.c.0.s8 %v560
  %v562 = vlaneseq
  %v563 = vshrl.u32 %v562, 7
  %v564 = vsub.s32 %v561, %v563
  %v565 = vrot.slane %v549, %v564
  %v567 = vunpack.c.l.s4 1966171168
  %v568 = vunpack.c.0.s8 %v567
  %v569 = vlaneseq
  %v570 = vshrl.u32 %v569, 7
  %v571 = vsub.s32 %v568, %v570
  %v572 = vrot.slane %v556, %v571
  %v574 = vunpack.c.l.s4 1966171168
  %v575 = vunpack.c.0.s8 %v574
  %v576 = vlaneseq
  %v577 = vshrl.u32 %v576, 7
  %v578 = vsub.s32 %v575, %v577
  %v579 = vrot.slane %v557, %v578
  %v581 = vunpack.c.l.s4 1966171168
  %v582 = vunpack.c.0.s8 %v581
  %v583 = vlaneseq
  %v584 = vshrl.u32 %v583, 7
  %v585 = vsub.s32 %v582, %v584
  %v586 = vrot.slane %v558, %v585
  %v587 = vcombine.high %v565, %v565
  %v588 = vcombine.high %v572, %v572
  %v589 = vcombine.high %v579, %v579
  %v590 = vcombine.high %v586, %v586
  %v591 = vcombine.high %v16, %v16
  %v593 = vunpack.c.l.s4 1966171168
  %v594 = vunpack.c.0.s8 %v593
  %v595 = vlaneseq
  %v596 = vshrl.u32 %v595, 7
  %v597 = vsub.s32 %v594, %v596
  %v598 = vrot.slane %v16, %v597
  %v600 = vunpack.c.l.s4 1966171168
  %v601 = vunpack.c.0.s8 %v600
  %v602 = vlaneseq
  %v603 = vshrl.u32 %v602, 7
  %v604 = vsub.s32 %v601, %v603
  %v605 = vrot.slane %v591, %v604
  %v606 = vcombine.high %v598, %v598
  %v607 = vcombine.high %v605, %v605
  %v609 = vunpack.c.l.s4 1966171168
  %v610 = vunpack.c.0.s8 %v609
  %v611 = vlaneseq
  %v612 = vshrl.u32 %v611, 7
  %v613 = vsub.s32 %v610, %v612
  %v614 = vrot.slane %v598, %v613
  %v616 = vunpack.c.l.s4 1966171168
  %v617 = vunpack.c.0.s8 %v616
  %v618 = vlaneseq
  %v619 = vshrl.u32 %v618, 7
  %v620 = vsub.s32 %v617, %v619
  %v621 = vrot.slane %v605, %v620
  %v623 = vunpack.c.l.s4 1966171168
  %v624 = vunpack.c.0.s8 %v623
  %v625 = vlaneseq
  %v626 = vshrl.u32 %v625, 7
  %v627 = vsub.s32 %v624, %v626
  %v628 = vrot.slane %v606, %v627
  %v630 = vunpack.c.l.s4 1966171168
  %v631 = vunpack.c.0.s8 %v630
  %v632 = vlaneseq
  %v633 = vshrl.u32 %v632, 7
  %v634 = vsub.s32 %v631, %v633
  %v635 = vrot.slane %v607, %v634
  %v636 = vcombine.high %v614, %v614
  %v637 = vcombine.high %v621, %v621
  %v638 = vcombine.high %v628, %v628
  %v639 = vcombine.high %v635, %v635
  %v640 = vcombine.high %v17, %v17
  %v642 = vunpack.c.l.s4 1966171168
  %v643 = vunpack.c.0.s8 %v642
  %v644 = vlaneseq
  %v645 = vshrl.u32 %v644, 7
  %v646 = vsub.s32 %v643, %v645
  %v647 = vrot.slane %v17, %v646
  %v649 = vunpack.c.l.s4 1966171168
  %v650 = vunpack.c.0.s8 %v649
  %v651 = vlaneseq
  %v652 = vshrl.u32 %v651, 7
  %v653 = vsub.s32 %v650, %v652
  %v654 = vrot.slane %v640, %v653
  %v655 = vcombine.high %v647, %v647
  %v656 = vcombine.high %v654, %v654
  %v658 = vunpack.c.l.s4 1966171168
  %v659 = vunpack.c.0.s8 %v658
  %v660 = vlaneseq
  %v661 = vshrl.u32 %v660, 7
  %v662 = vsub.s32 %v659, %v661
  %v663 = vrot.slane %v647, %v662
  %v665 = vunpack.c.l.s4 1966171168
  %v666 = vunpack.c.0.s8 %v665
  %v667 = vlaneseq
  %v668 = vshrl.u32 %v667, 7
  %v669 = vsub.s32 %v666, %v668
  %v670 = vrot.slane %v654, %v669
  %v672 = vunpack.c.l.s4 1966171168
  %v673 = vunpack.c.0.s8 %v672
  %v674 = vlaneseq
  %v675 = vshrl.u32 %v674, 7
  %v676 = vsub.s32 %v673, %v675
  %v677 = vrot.slane %v655, %v676
  %v679 = vunpack.c.l.s4 1966171168
  %v680 = vunpack.c.0.s8 %v679
  %v681 = vlaneseq
  %v682 = vshrl.u32 %v681, 7
  %v683 = vsub.s32 %v680, %v682
  %v684 = vrot.slane %v656, %v683
  %v685 = vcombine.high %v663, %v663
  %v686 = vcombine.high %v670, %v670
  %v687 = vcombine.high %v677, %v677
  %v688 = vcombine.high %v684, %v684
  %v689 = vcombine.high %v18, %v18
  %v691 = vunpack.c.l.s4 1966171168
  %v692 = vunpack.c.0.s8 %v691
  %v693 = vlaneseq
  %v694 = vshrl.u32 %v693, 7
  %v695 = vsub.s32 %v692, %v694
  %v696 = vrot.slane %v18, %v695
  %v698 = vunpack.c.l.s4 1966171168
  %v699 = vunpack.c.0.s8 %v698
  %v700 = vlaneseq
  %v701 = vshrl.u32 %v700, 7
  %v702 = vsub.s32 %v699, %v701
  %v703 = vrot.slane %v689, %v702
  %v704 = vcombine.high %v696, %v696
  %v705 = vcombine.high %v703, %v703
  %v707 = vunpack.c.l.s4 1966171168
  %v708 = vunpack.c.0.s8 %v707
  %v709 = vlaneseq
  %v710 = vshrl.u32 %v709, 7
  %v711 = vsub.s32 %v708, %v710
  %v712 = vrot.slane %v696, %v711
  %v714 = vunpack.c.l.s4 1966171168
  %v715 = vunpack.c.0.s8 %v714
  %v716 = vlaneseq
  %v717 = vshrl.u32 %v716, 7
  %v718 = vsub.s32 %v715, %v717
  %v719 = vrot.slane %v703, %v718
  %v721 = vunpack.c.l.s4 1966171168
  %v722 = vunpack.c.0.s8 %v721
  %v723 = vlaneseq
  %v724 = vshrl.u32 %v723, 7
  %v725 = vsub.s32 %v722, %v724
  %v726 = vrot.slane %v704, %v725
  %v728 = vunpack.c.l.s4 1966171168
  %v729 = vunpack.c.0.s8 %v728
  %v730 = vlaneseq
  %v731 = vshrl.u32 %v730, 7
  %v732 = vsub.s32 %v729, %v731
  %v733 = vrot.slane %v705, %v732
  %v734 = vcombine.high %v712, %v712
  %v735 = vcombine.high %v719, %v719
  %v736 = vcombine.high %v726, %v726
  %v737 = vcombine.high %v733, %v733
  %v1282 = vunpack.c.l.b16 %v19
  %v1283 = vunpack.c.l.b16 %v20
  %v1284 = vunpack.c.l.b16 %v21
  %v1285 = vunpack.c.l.b16 %v22
  %v1286 = vunpack.c.l.b16 %v23
  %v1287 = vunpack.c.l.b16 %v24
  %v1288 = vunpack.c.l.b16 %v25
  %v1289 = vunpack.c.l.b16 %v26
  %v1290 = vunpack.c.l.b16 %v27
  %v1291 = vunpack.c.l.b16 %v28
  %v1292 = vunpack.c.l.b16 %v29
  %v1293 = vunpack.c.l.b16 %v30
  %v1294 = vunpack.c.l.b16 %v31
  %v1295 = vunpack.c.l.b16 %v32
  %v1296 = vunpack.c.l.b16 %v33
  %v1297 = vunpack.c.l.b16 %v34
  %v1298 = vunpack.c.l.b16 %v35
  %v1299 = vunpack.c.l.b16 %v36
  %v1300 = vunpack.c.l.b16 %v37
  %v1301 = vunpack.c.l.b16 %v38
  %v1302 = vunpack.c.l.b16 %v39
  %v1303 = vunpack.c.l.b16 %v40
  %v1304 = vunpack.c.l.b16 %v41
  %v1305 = vunpack.c.l.b16 %v42
  %v1306 = vunpack.c.l.b16 %v43
  %v1307 = vunpack.c.l.b16 %v44
  %v1308 = vunpack.c.l.b16 %v45
  %v1309 = vunpack.c.l.b16 %v46
  %v1310 = vunpack.c.l.b16 %v47
  %v1311 = vunpack.c.l.b16 %v48
  %v1312 = vunpack.c.l.b16 %v49
  %v1313 = vunpack.c.l.b16 %v50
  %v1314 = vunpack.c.l.b16 %v51
  %v1315 = vunpack.c.l.b16 %v52
  %v1316 = vunpack.c.l.b16 %v53
  %v1317 = vunpack.c.l.b16 %v54
  %v1318 = vunpack.c.l.b16 %v55
  %v1319 = vunpack.c.l.b16 %v56
  %v1320 = vunpack.c.l.b16 %v57
  %v1321 = vunpack.c.l.b16 %v58
  %v1322 = vunpack.c.l.b16 %v59
  %v1323 = vunpack.c.l.b16 %v60
  %v1324 = vunpack.c.l.b16 %v61
  %v1325 = vunpack.c.l.b16 %v62
  %v1326 = vunpack.c.l.b16 %v63
  %v1327 = vunpack.c.l.b16 %v64
  %v1328 = vunpack.c.l.b16 %v65
  %v1329 = vunpack.c.l.b16 %v66
  %v1330 = vunpack.c.l.b16 %v67
  %v1331 = vunpack.c.l.b16 %v68
  %v1332 = vunpack.c.l.b16 %v69
  %v1333 = vunpack.c.l.b16 %v70
  %v1334 = vunpack.c.l.b16 %v71
  %v1335 = vunpack.c.l.b16 %v72
  %v1336 = vunpack.c.l.b16 %v73
  %v1337 = vunpack.c.l.b16 %v74
  %v1338 = vunpack.c.l.b16 %v75
  %v1339 = vunpack.c.l.b16 %v76
  %v1340 = vunpack.c.l.b16 %v77
  %v1341 = vunpack.c.l.b16 %v78
  %v1342 = vunpack.c.l.b16 %v79
  %v1343 = vunpack.c.l.b16 %v80
  %v1344 = vunpack.c.l.b16 %v81
  %v1345 = vunpack.c.l.b16 %v82
  %v1346 = vunpack.c.l.b16 %v83
  %v1347 = vunpack.c.l.b16 %v84
  %v1348 = vunpack.c.l.b16 %v85
  %v1349 = vunpack.c.l.b16 %v86
  %v1350 = vunpack.c.l.b16 %v87
  %v1351 = vunpack.c.l.b16 %v88
  %v1352 = vunpack.c.l.b16 %v89
  %v1353 = vunpack.c.l.b16 %v90
  %v1354 = vunpack.c.l.b16 %v91
  %v1355 = vunpack.c.l.b16 %v92
  %v1356 = vunpack.c.l.b16 %v93
  %v1357 = vunpack.c.l.b16 %v94
  %v1358 = vunpack.c.l.b16 %v95
  %v1359 = vunpack.c.l.b16 %v96
  %v1360 = vunpack.c.l.b16 %v97
  %v1361 = vunpack.c.l.b16 %v98
  %v1362 = vunpack.c.l.b16 %v99
  %v1363 = vunpack.c.l.b16 %v100
  %v1364 = vunpack.c.l.b16 %v101
  %v1365 = vunpack.c.l.b16 %v102
  %v1366 = vunpack.c.l.b16 %v103
  %v1367 = vunpack.c.l.b16 %v104
  %v1368 = vunpack.c.l.b16 %v105
  %v1369 = vunpack.c.l.b16 %v106
  %v1370 = vunpack.c.l.b16 %v107
  %v1371 = vunpack.c.l.b16 %v108
  %v1372 = vunpack.c.l.b16 %v109
  %v1373 = vunpack.c.l.b16 %v110
  %v1374 = vunpack.c.l.b16 %v111
  %v1375 = vunpack.c.l.b16 %v112
  %v1376 = vunpack.c.l.b16 %v113
  %v1377 = vunpack.c.l.b16 %v114
  %v1378 = vunpack.c.l.b16 %v115
  %v1379 = vunpack.c.l.b16 %v116
  %v1380 = vunpack.c.l.b16 %v117
  %v1381 = vunpack.c.l.b16 %v118
  %v1382 = vunpack.c.l.b16 %v119
  %v1383 = vunpack.c.l.b16 %v120
  %v1384 = vunpack.c.l.b16 %v121
  %v1385 = vunpack.c.l.b16 %v122
  %v1386 = vunpack.c.l.b16 %v123
  %v1387 = vunpack.c.l.b16 %v124
  %v1388 = vunpack.c.l.b16 %v125
  %v1389 = vunpack.c.l.b16 %v126
  %v1390 = vunpack.c.l.b16 %v127
  %v1391 = vunpack.c.l.b16 %v128
  %v1392 = vunpack.c.l.b16 %v129
  %v1393 = vunpack.c.l.b16 %v130
  %v1394 = vunpack.c.l.b16 %v131
  %v1395 = vunpack.c.l.b16 %v132
  %v1396 = vunpack.c.l.b16 %v133
  %v1397 = vunpack.c.l.b16 %v134
  %v1398 = vunpack.c.l.b16 %v135
  %v1399 = vunpack.c.l.b16 %v136
  %v1400 = vunpack.c.l.b16 %v137
  %v1401 = vunpack.c.l.b16 %v138
  %v1402 = vunpack.c.l.b16 %v139
  %v1403 = vunpack.c.l.b16 %v140
  %v1404 = vunpack.c.l.b16 %v141
  %v1405 = vunpack.c.l.b16 %v142
  %v1406 = vunpack.c.l.b16 %v143
  %v1407 = vunpack.c.l.b16 %v144
  %v1408 = vunpack.c.l.b16 %v145
  %v1409 = vunpack.c.l.b16 %v146
  %v1410 = vunpack.c.l.b16 %v147
  %v1411 = vunpack.c.l.b16 %v148
  %v1412 = vunpack.c.l.b16 %v149
  %v1413 = vunpack.c.l.b16 %v150
  %v1414 = vunpack.c.l.b16 %v151
  %v1415 = vunpack.c.l.b16 %v152
  %v1416 = vunpack.c.l.b16 %v153
  %v1417 = vunpack.c.l.b16 %v154
  %v1418 = vunpack.c.l.b16 %v155
  %v1419 = vunpack.c.l.b16 %v156
  %v1420 = vunpack.c.l.b16 %v157
  %v1421 = vunpack.c.l.b16 %v158
  %v1422 = vunpack.c.l.b16 %v159
  %v1423 = vunpack.c.l.b16 %v160
  %v1424 = vunpack.c.l.b16 %v161
  %v1425 = vunpack.c.l.b16 %v162
  %v1426 = vunpack.c.l.b16 %v163
  %v1427 = vunpack.c.l.b16 %v164
  %v1428 = vunpack.c.l.b16 %v165
  %v1429 = vunpack.c.l.b16 %v166
  %v1430 = vunpack.c.l.b16 %v167
  %v1431 = vunpack.c.l.b16 %v168
  %v1432 = vunpack.c.l.b16 %v169
  %v1433 = vunpack.c.l.b16 %v170
  %v1434 = vunpack.c.l.b16 %v171
  %v1435 = vunpack.c.l.b16 %v172
  %v1436 = vunpack.c.l.b16 %v173
  %v1437 = vunpack.c.l.b16 %v174
  %v1438 = vunpack.c.l.b16 %v175
  %v1439 = vunpack.c.l.b16 %v176
  %v1440 = vunpack.c.l.b16 %v177
  %v1441 = vunpack.c.l.b16 %v178
  %v1442 = vunpack.c.l.b16 %v179
  %v1443 = vunpack.c.l.b16 %v180
  %v1444 = vunpack.c.l.b16 %v181
  %v1445 = vunpack.c.l.b16 %v182
  %v1446 = vunpack.c.l.b16 %v183
  %v1447 = vunpack.c.l.b16 %v184
  %v1448 = vunpack.c.l.b16 %v185
  %v1449 = vunpack.c.l.b16 %v186
  %v1450 = vunpack.c.l.b16 %v187
  %v1451 = vunpack.c.l.b16 %v188
  %v1452 = vunpack.c.l.b16 %v189
  %v1453 = vunpack.c.l.b16 %v190
  %v1454 = vunpack.c.l.b16 %v191
  %v1455 = vunpack.c.l.b16 %v192
  %v1456 = vunpack.c.l.b16 %v193
  %v1457 = vunpack.c.l.b16 %v194
  %v1458 = vunpack.c.l.b16 %v195
  %v1459 = vunpack.c.l.b16 %v196
  %v1460 = vunpack.c.l.b16 %v197
  %v1461 = vunpack.c.l.b16 %v198
  %v1462 = vunpack.c.l.b16 %v199
  %v1463 = vunpack.c.l.b16 %v200
  %v1464 = vunpack.c.l.b16 %v201
  %v1465 = vunpack.c.l.b16 %v202
  %v1466 = vunpack.c.l.b16 %v203
  %v1467 = vunpack.c.l.b16 %v204
  %v1468 = vunpack.c.l.b16 %v205
  %v1469 = vunpack.c.l.b16 %v206
  %v1470 = vunpack.c.l.b16 %v207
  %v1471 = vunpack.c.l.b16 %v208
  %v1472 = vunpack.c.l.b16 %v209
  %v1473 = vunpack.c.l.b16 %v210
  %v1474 = vunpack.c.l.b16 %v211
  %v1475 = vunpack.c.l.b16 %v212
  %v1476 = vunpack.c.l.b16 %v213
  %v1477 = vunpack.c.l.b16 %v214
  %v1478 = vunpack.c.l.b16 %v215
  %v1479 = vunpack.c.l.b16 %v216
  %v1480 = vunpack.c.l.b16 %v217
  %v1481 = vunpack.c.l.b16 %v218
  %v1482 = vunpack.c.l.b16 %v219
  %v1483 = vunpack.c.l.b16 %v220
  %v1484 = vunpack.c.l.b16 %v221
  %v1485 = vunpack.c.l.b16 %v222
  %v1486 = vunpack.c.l.b16 %v223
  %v1487 = vunpack.c.l.b16 %v224
  %v1488 = vunpack.c.l.b16 %v225
  %v1489 = vunpack.c.l.b16 %v226
  %v1490 = vunpack.c.l.b16 %v227
  %v1491 = vunpack.c.l.b16 %v228
  %v1492 = vunpack.c.l.b16 %v229
  %v1493 = vunpack.c.l.b16 %v230
  %v1494 = vunpack.c.l.b16 %v231
  %v1495 = vunpack.c.l.b16 %v232
  %v1496 = vunpack.c.l.b16 %v233
  %v1497 = vunpack.c.l.b16 %v234
  %v1498 = vunpack.c.l.b16 %v235
  %v1499 = vunpack.c.l.b16 %v236
  %v1500 = vunpack.c.l.b16 %v237
  %v1501 = vunpack.c.l.b16 %v238
  %v1502 = vunpack.c.l.b16 %v239
  %v1503 = vunpack.c.l.b16 %v240
  %v1504 = vunpack.c.l.b16 %v241
  %v1505 = vunpack.c.l.b16 %v242
  %v1506 = vunpack.c.l.b16 %v243
  %v1507 = vunpack.c.l.b16 %v244
  %v1508 = vunpack.c.l.b16 %v245
  %v1509 = vunpack.c.l.b16 %v246
  %v1510 = vunpack.c.l.b16 %v247
  %v1511 = vunpack.c.l.b16 %v248
  %v1512 = vunpack.c.l.b16 %v249
  %v1513 = vunpack.c.l.b16 %v250
  %v1514 = vunpack.c.l.b16 %v251
  %v1515 = vunpack.c.l.b16 %v252
  %v1516 = vunpack.c.l.b16 %v253
  %v1517 = vunpack.c.l.b16 %v254
  %v1518 = vunpack.c.l.b16 %v255
  %v1519 = vunpack.c.l.b16 %v256
  %v1520 = vunpack.c.l.b16 %v257
  %v1521 = vunpack.c.l.b16 %v258
  %v1522 = vunpack.c.l.b16 %v259
  %v1523 = vunpack.c.l.b16 %v260
  %v1524 = vunpack.c.l.b16 %v261
  %v1525 = vunpack.c.l.b16 %v262
  %v1526 = vunpack.c.l.b16 %v263
  %v1527 = vunpack.c.l.b16 %v264
  %v1528 = vunpack.c.l.b16 %v265
  %v1529 = vunpack.c.l.b16 %v266
  %v1530 = vunpack.c.l.b16 %v267
  %v1531 = vunpack.c.l.b16 %v268
  %v1532 = vunpack.c.l.b16 %v269
  %v1533 = vunpack.c.l.b16 %v270
  %v1534 = vunpack.c.l.b16 %v271
  %v1535 = vunpack.c.l.b16 %v272
  %v1536 = vunpack.c.l.b16 %v273
  %v1537 = vunpack.c.l.b16 %v274
  %v1538 = vunpack.c.l.b16 %v275
  %v1539 = vunpack.c.l.b16 %v276
  %v1540 = vunpack.c.l.b16 %v277
  %v1541 = vunpack.c.l.b16 %v278
  %v1542 = vunpack.c.l.b16 %v279
  %v1543 = vunpack.c.l.b16 %v280
  %v1544 = vunpack.c.l.b16 %v281
  %v1545 = vunpack.c.l.b16 %v282
  %v1546 = vunpack.c.l.b16 %v283
  %v1547 = vunpack.c.l.b16 %v284
  %v1548 = vunpack.c.l.b16 %v285
  %v1549 = vunpack.c.l.b16 %v286
  %v1550 = vunpack.c.l.b16 %v287
  %v1551 = vunpack.c.l.b16 %v288
  %v1552 = vunpack.c.l.b16 %v289
  %v1553 = vunpack.c.l.b16 %v290
  %v1554 = vunpack.c.l.b16 %v291
  %v1555 = vunpack.c.l.b16 %v292
  %v1556 = vunpack.c.l.b16 %v293
  %v1557 = vunpack.c.l.b16 %v294
  %v1558 = vunpack.c.l.b16 %v295
  %v1559 = vunpack.c.l.b16 %v296
  %v1560 = vunpack.c.l.b16 %v297
  %v1561 = vunpack.c.l.b16 %v298
  %v1562 = vunpack.c.l.b16 %v299
  %v1563 = vunpack.c.l.b16 %v300
  %v1564 = vunpack.c.l.b16 %v301
  %v1565 = vunpack.c.l.b16 %v302
  %v1566 = vunpack.c.l.b16 %v303
  %v1567 = vunpack.c.l.b16 %v304
  %v1568 = vunpack.c.l.b16 %v305
  %v1569 = vunpack.c.l.b16 %v306
  %v1570 = vunpack.c.l.b16 %v307
  %v1571 = vunpack.c.l.b16 %v308
  %v1572 = vunpack.c.l.b16 %v309
  %v1573 = vunpack.c.l.b16 %v310
  %v1574 = vunpack.c.l.b16 %v311
  %v1575 = vunpack.c.l.b16 %v312
  %v1576 = vunpack.c.l.b16 %v313
  %v1577 = vunpack.c.l.b16 %v314
  %v1578 = vunpack.c.l.b16 %v315
  %v1579 = vunpack.c.l.b16 %v316
  %v1580 = vunpack.c.l.b16 %v317
  %v1581 = vunpack.c.l.b16 %v318
  %v1582 = vunpack.c.l.b16 %v319
  %v1583 = vunpack.c.l.b16 %v320
  %v1584 = vunpack.c.l.b16 %v321
  %v1585 = vunpack.c.l.b16 %v322
  %v1586 = vunpack.c.l.b16 %v323
  %v1587 = vunpack.c.l.b16 %v324
  %v1588 = vunpack.c.l.b16 %v325
  %v1589 = vunpack.c.l.b16 %v326
  %v1590 = vunpack.c.l.b16 %v327
  %v1591 = vunpack.c.l.b16 %v328
  %v1592 = vunpack.c.l.b16 %v329
  %v1593 = vunpack.c.l.b16 %v330
  %v1594 = vunpack.c.l.b16 %v331
  %v1595 = vunpack.c.l.b16 %v332
  %v1596 = vunpack.c.l.b16 %v333
  %v1597 = vunpack.c.l.b16 %v334
  %v1598 = vunpack.c.l.b16 %v335
  %v1599 = vunpack.c.l.b16 %v336
  %v1600 = vunpack.c.l.b16 %v337
  %v1601 = vunpack.c.l.b16 %v338
  %v1602 = vunpack.c.l.b16 %v339
  %v1603 = vunpack.c.l.b16 %v340
  %v1604 = vunpack.c.l.b16 %v341
  %v1605 = vunpack.c.l.b16 %v342
  %v1606 = vunpack.c.l.b16 %v343
  %v1607 = vunpack.c.l.b16 %v344
  %v1608 = vunpack.c.l.b16 %v345
  %v1609 = vunpack.c.l.b16 %v346
  %v1610 = vunpack.c.l.b16 %v347
  %v1611 = vunpack.c.l.b16 %v348
  %v1612 = vunpack.c.l.b16 %v349
  %v1613 = vunpack.c.l.b16 %v350
  %v1614 = vunpack.c.l.b16 %v351
  %v1615 = vunpack.c.l.b16 %v352
  %v1616 = vunpack.c.l.b16 %v353
  %v1617 = vunpack.c.l.b16 %v354
  %v1618 = vunpack.c.l.b16 %v355
  %v1619 = vunpack.c.l.b16 %v356
  %v1620 = vunpack.c.l.b16 %v357
  %v1621 = vunpack.c.l.b16 %v358
  %v1622 = vunpack.c.l.b16 %v359
  %v1623 = vunpack.c.l.b16 %v360
  %v1624 = vunpack.c.l.b16 %v361
  %v1625 = vunpack.c.l.b16 %v362
  %v1626 = vunpack.c.l.b16 %v363
  %v1627 = vunpack.c.l.b16 %v364
  %v1628 = vunpack.c.l.b16 %v365
  %v1629 = vunpack.c.l.b16 %v366
  %v1630 = vunpack.c.l.b16 %v367
  %v1631 = vunpack.c.l.b16 %v368
  %v1632 = vunpack.c.l.b16 %v369
  %v1633 = vunpack.c.l.b16 %v370
  %v1634 = vunpack.c.l.b16 %v371
  %v1635 = vunpack.c.l.b16 %v372
  %v1636 = vunpack.c.l.b16 %v373
  %v1637 = vunpack.c.l.b16 %v374
  %v1638 = vunpack.c.l.b16 %v375
  %v1639 = vunpack.c.l.b16 %v376
  %v1640 = vunpack.c.l.b16 %v377
  %v1641 = vunpack.c.l.b16 %v378
  %v1642 = vunpack.c.l.b16 %v379
  %v1643 = vunpack.c.l.b16 %v380
  %v1644 = vunpack.c.l.b16 %v381
  %v1645 = vunpack.c.l.b16 %v382
  %v1646 = vunpack.c.l.b16 %v383
  %v1647 = vunpack.c.l.b16 %v384
  %v1648 = vunpack.c.l.b16 %v385
  %v1649 = vunpack.c.l.b16 %v386
  %v1650 = vunpack.c.l.b16 %v387
  %v1651 = vunpack.c.l.b16 %v388
  %v1652 = vunpack.c.l.b16 %v389
  %v1653 = vunpack.c.l.b16 %v390
  %v1654 = vunpack.c.l.b16 %v391
  %v1655 = vunpack.c.l.b16 %v392
  %v1656 = vunpack.c.l.b16 %v393
  %v1657 = vunpack.c.l.b16 %v394
  %v1658 = vunpack.c.l.b16 %v395
  %v1659 = vunpack.c.l.b16 %v396
  %v1660 = vunpack.c.l.b16 %v397
  %v1661 = vunpack.c.l.b16 %v398
  %v1662 = vunpack.c.l.b16 %v399
  %v1663 = vunpack.c.l.b16 %v400
  %v1664 = vunpack.c.l.b16 %v401
  %v1665 = vunpack.c.l.b16 %v402
  %v1666 = vunpack.c.l.b16 %v403
  %v1667 = vunpack.c.l.b16 %v404
  %v1668 = vunpack.c.l.b16 %v405
  %v1669 = vunpack.c.l.b16 %v406
  %v1670 = vunpack.c.l.b16 %v407
  %v1671 = vunpack.c.l.b16 %v408
  %v1672 = vunpack.c.l.b16 %v409
  %v1673 = vunpack.c.l.b16 %v410
  %v1674 = vunpack.c.l.b16 %v411
  %v1675 = vunpack.c.l.b16 %v412
  %v1676 = vunpack.c.l.b16 %v413
  %v1677 = vunpack.c.l.b16 %v414
  %v1678 = vunpack.c.l.b16 %v415
  %v1679 = vunpack.c.l.b16 %v416
  %v1680 = vunpack.c.l.b16 %v417
  %v1681 = vunpack.c.l.b16 %v418
  %v1682 = vunpack.c.l.b16 %v419
  %v1683 = vunpack.c.l.b16 %v420
  %v1684 = vunpack.c.l.b16 %v421
  %v1685 = vunpack.c.l.b16 %v422
  %v1686 = vunpack.c.l.b16 %v423
  %v1687 = vunpack.c.l.b16 %v424
  %v1688 = vunpack.c.l.b16 %v425
  %v1689 = vunpack.c.l.b16 %v426
  %v1690 = vunpack.c.l.b16 %v427
  %v1691 = vunpack.c.l.b16 %v428
  %v1692 = vunpack.c.l.b16 %v429
  %v1693 = vunpack.c.l.b16 %v430
  %v1694 = vunpack.c.l.b16 %v431
  %v1695 = vunpack.c.l.b16 %v432
  %v1696 = vunpack.c.l.b16 %v433
  %v1697 = vunpack.c.l.b16 %v434
  %v1698 = vunpack.c.l.b16 %v435
  %v1699 = vunpack.c.l.b16 %v436
  %v1700 = vunpack.c.l.b16 %v437
  %v1701 = vunpack.c.l.b16 %v438
  %v1702 = vunpack.c.l.b16 %v439
  %v1703 = vunpack.c.l.b16 %v440
  %v1704 = vunpack.c.l.b16 %v441
  %v1705 = vunpack.c.l.b16 %v442
  %v1706 = vunpack.c.l.b16 %v443
  %v1707 = vunpack.c.l.b16 %v444
  %v1708 = vunpack.c.l.b16 %v445
  %v1709 = vunpack.c.l.b16 %v446
  %v1710 = vunpack.c.l.b16 %v447
  %v1711 = vunpack.c.l.b16 %v448
  %v1712 = vunpack.c.l.b16 %v449
  %v1713 = vunpack.c.l.b16 %v450
  %v1714 = vunpack.c.l.b16 %v451
  %v1715 = vunpack.c.l.b16 %v452
  %v1716 = vunpack.c.l.b16 %v453
  %v1717 = vunpack.c.l.b16 %v454
  %v1718 = vunpack.c.l.b16 %v455
  %v1719 = vunpack.c.l.b16 %v456
  %v1720 = vunpack.c.l.b16 %v457
  %v1721 = vunpack.c.l.b16 %v458
  %v1722 = vunpack.c.l.b16 %v459
  %v1723 = vunpack.c.l.b16 %v460
  %v1724 = vunpack.c.l.b16 %v461
  %v1725 = vunpack.c.l.b16 %v462
  %v1726 = vunpack.c.l.b16 %v463
  %v1727 = vunpack.c.l.b16 %v464
  %v1728 = vunpack.c.l.b16 %v465
  %v1729 = vunpack.c.l.b16 %v466
  %v1730 = vunpack.c.l.b16 %v467
  %v1731 = vunpack.c.l.b16 %v468
  %v1732 = vunpack.c.l.b16 %v469
  %v1733 = vunpack.c.l.b16 %v470
  %v1734 = vunpack.c.l.b16 %v471
  %v1735 = vunpack.c.l.b16 %v472
  %v1736 = vunpack.c.l.b16 %v473
  %v1737 = vunpack.c.l.b16 %v474
  %v1738 = vunpack.c.l.b16 %v475
  %v1739 = vunpack.c.l.b16 %v476
  %v1740 = vunpack.c.l.b16 %v477
  %v1741 = vunpack.c.l.b16 %v478
  %v1742 = vunpack.c.l.b16 %v479
  %v1743 = vunpack.c.l.b16 %v480
  %v1744 = vunpack.c.l.b16 %v481
  %v1745 = vunpack.c.l.b16 %v482
  %v1746 = vunpack.c.l.b16 %v483
  %v1747 = vunpack.c.l.b16 %v484
  %v1748 = vunpack.c.l.b16 %v485
  %v1749 = vunpack.c.l.b16 %v486
  %v1750 = vunpack.c.l.b16 %v487
  %v1751 = vunpack.c.l.b16 %v488
  %v1752 = vunpack.c.l.b16 %v489
  %v1753 = vunpack.c.l.b16 %v490
  %v1754 = vunpack.c.l.b16 %v491
  %v1755 = vunpack.c.l.b16 %v492
  %v1756 = vunpack.c.l.b16 %v493
  %v1757 = vunpack.c.l.b16 %v494
  %v1758 = vunpack.c.l.b16 %v495
  %v1759 = vunpack.c.l.b16 %v496
  %v1760 = vunpack.c.l.b16 %v497
  %v1761 = vunpack.c.l.b16 %v498
  %v1762 = vunpack.c.l.b16 %v499
  %v1763 = vunpack.c.l.b16 %v500
  %v1764 = vunpack.c.l.b16 %v501
  %v1765 = vunpack.c.l.b16 %v502
  %v1766 = vunpack.c.l.b16 %v503
  %v1767 = vunpack.c.l.b16 %v504
  %v1768 = vunpack.c.l.b16 %v505
  %v1769 = vunpack.c.l.b16 %v506
  %v1770 = vunpack.c.l.b16 %v507
  %v1771 = vunpack.c.l.b16 %v508
  %v1772 = vunpack.c.l.b16 %v509
  %v1773 = vunpack.c.l.b16 %v510
  %v1774 = vunpack.c.l.b16 %v511
  %v1775 = vunpack.c.l.b16 %v512
  %v1776 = vunpack.c.l.b16 %v513
  %v1777 = vunpack.c.l.b16 %v514
  %v1778 = vunpack.c.l.b16 %v515
  %v1779 = vunpack.c.l.b16 %v516
  %v1780 = vunpack.c.l.b16 %v517
  %v1781 = vunpack.c.l.b16 %v518
  %v1782 = vunpack.c.l.b16 %v519
  %v1783 = vunpack.c.l.b16 %v520
  %v1784 = vunpack.c.l.b16 %v521
  %v1785 = vunpack.c.l.b16 %v522
  %v1786 = vunpack.c.l.b16 %v523
  %v1787 = vunpack.c.l.b16 %v524
  %v1788 = vunpack.c.l.b16 %v525
  %v1789 = vunpack.c.l.b16 %v526
  %v1790 = vunpack.c.l.b16 %v527
  %v1791 = vunpack.c.l.b16 %v528
  %v1792 = vunpack.c.l.b16 %v529
  %v1793 = vunpack.c.l.b16 %v530
  %v1794 = vpack.c.b16 %v1283, %v1282
  %v1795 = vpack.c.b16 %v1285, %v1284
  %v1796 = vpack.c.b16 %v1287, %v1286
  %v1797 = vpack.c.b16 %v1289, %v1288
  %v1798 = vpack.c.b16 %v1291, %v1290
  %v1799 = vpack.c.b16 %v1293, %v1292
  %v1800 = vpack.c.b16 %v1295, %v1294
  %v1801 = vpack.c.b16 %v1297, %v1296
  %v1802 = vpack.c.b16 %v1299, %v1298
  %v1803 = vpack.c.b16 %v1301, %v1300
  %v1804 = vpack.c.b16 %v1303, %v1302
  %v1805 = vpack.c.b16 %v1305, %v1304
  %v1806 = vpack.c.b16 %v1307, %v1306
  %v1807 = vpack.c.b16 %v1309, %v1308
  %v1808 = vpack.c.b16 %v1311, %v1310
  %v1809 = vpack.c.b16 %v1313, %v1312
  %v1810 = vpack.c.b16 %v1315, %v1314
  %v1811 = vpack.c.b16 %v1317, %v1316
  %v1812 = vpack.c.b16 %v1319, %v1318
  %v1813 = vpack.c.b16 %v1321, %v1320
  %v1814 = vpack.c.b16 %v1323, %v1322
  %v1815 = vpack.c.b16 %v1325, %v1324
  %v1816 = vpack.c.b16 %v1327, %v1326
  %v1817 = vpack.c.b16 %v1329, %v1328
  %v1818 = vpack.c.b16 %v1331, %v1330
  %v1819 = vpack.c.b16 %v1333, %v1332
  %v1820 = vpack.c.b16 %v1335, %v1334
  %v1821 = vpack.c.b16 %v1337, %v1336
  %v1822 = vpack.c.b16 %v1339, %v1338
  %v1823 = vpack.c.b16 %v1341, %v1340
  %v1824 = vpack.c.b16 %v1343, %v1342
  %v1825 = vpack.c.b16 %v1345, %v1344
  %v1826 = vpack.c.b16 %v1347, %v1346
  %v1827 = vpack.c.b16 %v1349, %v1348
  %v1828 = vpack.c.b16 %v1351, %v1350
  %v1829 = vpack.c.b16 %v1353, %v1352
  %v1830 = vpack.c.b16 %v1355, %v1354
  %v1831 = vpack.c.b16 %v1357, %v1356
  %v1832 = vpack.c.b16 %v1359, %v1358
  %v1833 = vpack.c.b16 %v1361, %v1360
  %v1834 = vpack.c.b16 %v1363, %v1362
  %v1835 = vpack.c.b16 %v1365, %v1364
  %v1836 = vpack.c.b16 %v1367, %v1366
  %v1837 = vpack.c.b16 %v1369, %v1368
  %v1838 = vpack.c.b16 %v1371, %v1370
  %v1839 = vpack.c.b16 %v1373, %v1372
  %v1840 = vpack.c.b16 %v1375, %v1374
  %v1841 = vpack.c.b16 %v1377, %v1376
  %v1842 = vpack.c.b16 %v1379, %v1378
  %v1843 = vpack.c.b16 %v1381, %v1380
  %v1844 = vpack.c.b16 %v1383, %v1382
  %v1845 = vpack.c.b16 %v1385, %v1384
  %v1846 = vpack.c.b16 %v1387, %v1386
  %v1847 = vpack.c.b16 %v1389, %v1388
  %v1848 = vpack.c.b16 %v1391, %v1390
  %v1849 = vpack.c.b16 %v1393, %v1392
  %v1850 = vpack.c.b16 %v1395, %v1394
  %v1851 = vpack.c.b16 %v1397, %v1396
  %v1852 = vpack.c.b16 %v1399, %v1398
  %v1853 = vpack.c.b16 %v1401, %v1400
  %v1854 = vpack.c.b16 %v1403, %v1402
  %v1855 = vpack.c.b16 %v1405, %v1404
  %v1856 = vpack.c.b16 %v1407, %v1406
  %v1857 = vpack.c.b16 %v1409, %v1408
  %v1858 = vpack.c.b16 %v1411, %v1410
  %v1859 = vpack.c.b16 %v1413, %v1412
  %v1860 = vpack.c.b16 %v1415, %v1414
  %v1861 = vpack.c.b16 %v1417, %v1416
  %v1862 = vpack.c.b16 %v1419, %v1418
  %v1863 = vpack.c.b16 %v1421, %v1420
  %v1864 = vpack.c.b16 %v1423, %v1422
  %v1865 = vpack.c.b16 %v1425, %v1424
  %v1866 = vpack.c.b16 %v1427, %v1426
  %v1867 = vpack.c.b16 %v1429, %v1428
  %v1868 = vpack.c.b16 %v1431, %v1430
  %v1869 = vpack.c.b16 %v1433, %v1432
  %v1870 = vpack.c.b16 %v1435, %v1434
  %v1871 = vpack.c.b16 %v1437, %v1436
  %v1872 = vpack.c.b16 %v1439, %v1438
  %v1873 = vpack.c.b16 %v1441, %v1440
  %v1874 = vpack.c.b16 %v1443, %v1442
  %v1875 = vpack.c.b16 %v1445, %v1444
  %v1876 = vpack.c.b16 %v1447, %v1446
  %v1877 = vpack.c.b16 %v1449, %v1448
  %v1878 = vpack.c.b16 %v1451, %v1450
  %v1879 = vpack.c.b16 %v1453, %v1452
  %v1880 = vpack.c.b16 %v1455, %v1454
  %v1881 = vpack.c.b16 %v1457, %v1456
  %v1882 = vpack.c.b16 %v1459, %v1458
  %v1883 = vpack.c.b16 %v1461, %v1460
  %v1884 = vpack.c.b16 %v1463, %v1462
  %v1885 = vpack.c.b16 %v1465, %v1464
  %v1886 = vpack.c.b16 %v1467, %v1466
  %v1887 = vpack.c.b16 %v1469, %v1468
  %v1888 = vpack.c.b16 %v1471, %v1470
  %v1889 = vpack.c.b16 %v1473, %v1472
  %v1890 = vpack.c.b16 %v1475, %v1474
  %v1891 = vpack.c.b16 %v1477, %v1476
  %v1892 = vpack.c.b16 %v1479, %v1478
  %v1893 = vpack.c.b16 %v1481, %v1480
  %v1894 = vpack.c.b16 %v1483, %v1482
  %v1895 = vpack.c.b16 %v1485, %v1484
  %v1896 = vpack.c.b16 %v1487, %v1486
  %v1897 = vpack.c.b16 %v1489, %v1488
  %v1898 = vpack.c.b16 %v1491, %v1490
  %v1899 = vpack.c.b16 %v1493, %v1492
  %v1900 = vpack.c.b16 %v1495, %v1494
  %v1901 = vpack.c.b16 %v1497, %v1496
  %v1902 = vpack.c.b16 %v1499, %v1498
  %v1903 = vpack.c.b16 %v1501, %v1500
  %v1904 = vpack.c.b16 %v1503, %v1502
  %v1905 = vpack.c.b16 %v1505, %v1504
  %v1906 = vpack.c.b16 %v1507, %v1506
  %v1907 = vpack.c.b16 %v1509, %v1508
  %v1908 = vpack.c.b16 %v1511, %v1510
  %v1909 = vpack.c.b16 %v1513, %v1512
  %v1910 = vpack.c.b16 %v1515, %v1514
  %v1911 = vpack.c.b16 %v1517, %v1516
  %v1912 = vpack.c.b16 %v1519, %v1518
  %v1913 = vpack.c.b16 %v1521, %v1520
  %v1914 = vpack.c.b16 %v1523, %v1522
  %v1915 = vpack.c.b16 %v1525, %v1524
  %v1916 = vpack.c.b16 %v1527, %v1526
  %v1917 = vpack.c.b16 %v1529, %v1528
  %v1918 = vpack.c.b16 %v1531, %v1530
  %v1919 = vpack.c.b16 %v1533, %v1532
  %v1920 = vpack.c.b16 %v1535, %v1534
  %v1921 = vpack.c.b16 %v1537, %v1536
  %v1922 = vpack.c.b16 %v1539, %v1538
  %v1923 = vpack.c.b16 %v1541, %v1540
  %v1924 = vpack.c.b16 %v1543, %v1542
  %v1925 = vpack.c.b16 %v1545, %v1544
  %v1926 = vpack.c.b16 %v1547, %v1546
  %v1927 = vpack.c.b16 %v1549, %v1548
  %v1928 = vpack.c.b16 %v1551, %v1550
  %v1929 = vpack.c.b16 %v1553, %v1552
  %v1930 = vpack.c.b16 %v1555, %v1554
  %v1931 = vpack.c.b16 %v1557, %v1556
  %v1932 = vpack.c.b16 %v1559, %v1558
  %v1933 = vpack.c.b16 %v1561, %v1560
  %v1934 = vpack.c.b16 %v1563, %v1562
  %v1935 = vpack.c.b16 %v1565, %v1564
  %v1936 = vpack.c.b16 %v1567, %v1566
  %v1937 = vpack.c.b16 %v1569, %v1568
  %v1938 = vpack.c.b16 %v1571, %v1570
  %v1939 = vpack.c.b16 %v1573, %v1572
  %v1940 = vpack.c.b16 %v1575, %v1574
  %v1941 = vpack.c.b16 %v1577, %v1576
  %v1942 = vpack.c.b16 %v1579, %v1578
  %v1943 = vpack.c.b16 %v1581, %v1580
  %v1944 = vpack.c.b16 %v1583, %v1582
  %v1945 = vpack.c.b16 %v1585, %v1584
  %v1946 = vpack.c.b16 %v1587, %v1586
  %v1947 = vpack.c.b16 %v1589, %v1588
  %v1948 = vpack.c.b16 %v1591, %v1590
  %v1949 = vpack.c.b16 %v1593, %v1592
  %v1950 = vpack.c.b16 %v1595, %v1594
  %v1951 = vpack.c.b16 %v1597, %v1596
  %v1952 = vpack.c.b16 %v1599, %v1598
  %v1953 = vpack.c.b16 %v1601, %v1600
  %v1954 = vpack.c.b16 %v1603, %v1602
  %v1955 = vpack.c.b16 %v1605, %v1604
  %v1956 = vpack.c.b16 %v1607, %v1606
  %v1957 = vpack.c.b16 %v1609, %v1608
  %v1958 = vpack.c.b16 %v1611, %v1610
  %v1959 = vpack.c.b16 %v1613, %v1612
  %v1960 = vpack.c.b16 %v1615, %v1614
  %v1961 = vpack.c.b16 %v1617, %v1616
  %v1962 = vpack.c.b16 %v1619, %v1618
  %v1963 = vpack.c.b16 %v1621, %v1620
  %v1964 = vpack.c.b16 %v1623, %v1622
  %v1965 = vpack.c.b16 %v1625, %v1624
  %v1966 = vpack.c.b16 %v1627, %v1626
  %v1967 = vpack.c.b16 %v1629, %v1628
  %v1968 = vpack.c.b16 %v1631, %v1630
  %v1969 = vpack.c.b16 %v1633, %v1632
  %v1970 = vpack.c.b16 %v1635, %v1634
  %v1971 = vpack.c.b16 %v1637, %v1636
  %v1972 = vpack.c.b16 %v1639, %v1638
  %v1973 = vpack.c.b16 %v1641, %v1640
  %v1974 = vpack.c.b16 %v1643, %v1642
  %v1975 = vpack.c.b16 %v1645, %v1644
  %v1976 = vpack.c.b16 %v1647, %v1646
  %v1977 = vpack.c.b16 %v1649, %v1648
  %v1978 = vpack.c.b16 %v1651, %v1650
  %v1979 = vpack.c.b16 %v1653, %v1652
  %v1980 = vpack.c.b16 %v1655, %v1654
  %v1981 = vpack.c.b16 %v1657, %v1656
  %v1982 = vpack.c.b16 %v1659, %v1658
  %v1983 = vpack.c.b16 %v1661, %v1660
  %v1984 = vpack.c.b16 %v1663, %v1662
  %v1985 = vpack.c.b16 %v1665, %v1664
  %v1986 = vpack.c.b16 %v1667, %v1666
  %v1987 = vpack.c.b16 %v1669, %v1668
  %v1988 = vpack.c.b16 %v1671, %v1670
  %v1989 = vpack.c.b16 %v1673, %v1672
  %v1990 = vpack.c.b16 %v1675, %v1674
  %v1991 = vpack.c.b16 %v1677, %v1676
  %v1992 = vpack.c.b16 %v1679, %v1678
  %v1993 = vpack.c.b16 %v1681, %v1680
  %v1994 = vpack.c.b16 %v1683, %v1682
  %v1995 = vpack.c.b16 %v1685, %v1684
  %v1996 = vpack.c.b16 %v1687, %v1686
  %v1997 = vpack.c.b16 %v1689, %v1688
  %v1998 = vpack.c.b16 %v1691, %v1690
  %v1999 = vpack.c.b16 %v1693, %v1692
  %v2000 = vpack.c.b16 %v1695, %v1694
  %v2001 = vpack.c.b16 %v1697, %v1696
  %v2002 = vpack.c.b16 %v1699, %v1698
  %v2003 = vpack.c.b16 %v1701, %v1700
  %v2004 = vpack.c.b16 %v1703, %v1702
  %v2005 = vpack.c.b16 %v1705, %v1704
  %v2006 = vpack.c.b16 %v1707, %v1706
  %v2007 = vpack.c.b16 %v1709, %v1708
  %v2008 = vpack.c.b16 %v1711, %v1710
  %v2009 = vpack.c.b16 %v1713, %v1712
  %v2010 = vpack.c.b16 %v1715, %v1714
  %v2011 = vpack.c.b16 %v1717, %v1716
  %v2012 = vpack.c.b16 %v1719, %v1718
  %v2013 = vpack.c.b16 %v1721, %v1720
  %v2014 = vpack.c.b16 %v1723, %v1722
  %v2015 = vpack.c.b16 %v1725, %v1724
  %v2016 = vpack.c.b16 %v1727, %v1726
  %v2017 = vpack.c.b16 %v1729, %v1728
  %v2018 = vpack.c.b16 %v1731, %v1730
  %v2019 = vpack.c.b16 %v1733, %v1732
  %v2020 = vpack.c.b16 %v1735, %v1734
  %v2021 = vpack.c.b16 %v1737, %v1736
  %v2022 = vpack.c.b16 %v1739, %v1738
  %v2023 = vpack.c.b16 %v1741, %v1740
  %v2024 = vpack.c.b16 %v1743, %v1742
  %v2025 = vpack.c.b16 %v1745, %v1744
  %v2026 = vpack.c.b16 %v1747, %v1746
  %v2027 = vpack.c.b16 %v1749, %v1748
  %v2028 = vpack.c.b16 %v1751, %v1750
  %v2029 = vpack.c.b16 %v1753, %v1752
  %v2030 = vpack.c.b16 %v1755, %v1754
  %v2031 = vpack.c.b16 %v1757, %v1756
  %v2032 = vpack.c.b16 %v1759, %v1758
  %v2033 = vpack.c.b16 %v1761, %v1760
  %v2034 = vpack.c.b16 %v1763, %v1762
  %v2035 = vpack.c.b16 %v1765, %v1764
  %v2036 = vpack.c.b16 %v1767, %v1766
  %v2037 = vpack.c.b16 %v1769, %v1768
  %v2038 = vpack.c.b16 %v1771, %v1770
  %v2039 = vpack.c.b16 %v1773, %v1772
  %v2040 = vpack.c.b16 %v1775, %v1774
  %v2041 = vpack.c.b16 %v1777, %v1776
  %v2042 = vpack.c.b16 %v1779, %v1778
  %v2043 = vpack.c.b16 %v1781, %v1780
  %v2044 = vpack.c.b16 %v1783, %v1782
  %v2045 = vpack.c.b16 %v1785, %v1784
  %v2046 = vpack.c.b16 %v1787, %v1786
  %v2047 = vpack.c.b16 %v1789, %v1788
  %v2048 = vpack.c.b16 %v1791, %v1790
  %v2049 = vpack.c.b16 %v1793, %v1792
  %2306 = vmatprep.subr.bf16.mxu0 0
  %2307 = vmatpush1.bf16.msra.mxu0 %v1794
  %2308 = vmatprep.subr.bf16.mxu0 0
  %2309 = vmatpush1.bf16.msra.mxu0 %v1795
  %2310 = vmatprep.subr.bf16.mxu0 0
  %2311 = vmatpush1.bf16.msra.mxu0 %v1796
  %2312 = vmatprep.subr.bf16.mxu0 0
  %2313 = vmatpush1.bf16.msra.mxu0 %v1797
  %2314 = vmatprep.subr.bf16.mxu0 0
  %2315 = vmatpush1.bf16.msra.mxu0 %v1798
  %2316 = vmatprep.subr.bf16.mxu0 0
  %2317 = vmatpush1.bf16.msra.mxu0 %v1799
  %2318 = vmatprep.subr.bf16.mxu0 0
  %2319 = vmatpush1.bf16.msra.mxu0 %v1800
  %2320 = vmatprep.subr.bf16.mxu0 0
  %2321 = vmatpush1.bf16.msra.mxu0 %v1801
  %2322 = vmatprep.subr.bf16.mxu0 0
  %2323 = vmatpush1.bf16.msra.mxu0 %v1802
  %2324 = vmatprep.subr.bf16.mxu0 0
  %2325 = vmatpush1.bf16.msra.mxu0 %v1803
  %2326 = vmatprep.subr.bf16.mxu0 0
  %2327 = vmatpush1.bf16.msra.mxu0 %v1804
  %2328 = vmatprep.subr.bf16.mxu0 0
  %2329 = vmatpush1.bf16.msra.mxu0 %v1805
  %2330 = vmatprep.subr.bf16.mxu0 0
  %2331 = vmatpush1.bf16.msra.mxu0 %v1806
  %2332 = vmatprep.subr.bf16.mxu0 0
  %2333 = vmatpush1.bf16.msra.mxu0 %v1807
  %2334 = vmatprep.subr.bf16.mxu0 0
  %2335 = vmatpush1.bf16.msra.mxu0 %v1808
  %2336 = vmatprep.subr.bf16.mxu0 0
  %2337 = vmatpush1.bf16.msra.mxu0 %v1809
  %2338 = vmatprep.mubr.bf16.mxu0 %v579
  %2339 = vmatmul.mubr.bf16.gmra.mrb[0].mxu0 %v565
  %v2340 = vpop.f32.mrb[0].mxu0
  %v2341 = vadd.f32 %v536, %v2340
  %v2342 = vpop.f32.mrb[0].mxu0
  %v2343 = vpop.f32.mrb[0].mxu0
  %v2344 = vpop.f32.mrb[0].mxu0
  %2345 = vdwg.mxu0
  %2346 = vmatprep.subr.bf16.mxu0 0
  %2347 = vmatpush1.bf16.msra.mxu0 %v1810
  %2348 = vmatprep.subr.bf16.mxu0 0
  %2349 = vmatpush1.bf16.msra.mxu0 %v1811
  %2350 = vmatprep.subr.bf16.mxu0 0
  %2351 = vmatpush1.bf16.msra.mxu0 %v1812
  %2352 = vmatprep.subr.bf16.mxu0 0
  %2353 = vmatpush1.bf16.msra.mxu0 %v1813
  %2354 = vmatprep.subr.bf16.mxu0 0
  %2355 = vmatpush1.bf16.msra.mxu0 %v1814
  %2356 = vmatprep.subr.bf16.mxu0 0
  %2357 = vmatpush1.bf16.msra.mxu0 %v1815
  %2358 = vmatprep.subr.bf16.mxu0 0
  %2359 = vmatpush1.bf16.msra.mxu0 %v1816
  %2360 = vmatprep.subr.bf16.mxu0 0
  %2361 = vmatpush1.bf16.msra.mxu0 %v1817
  %2362 = vmatprep.subr.bf16.mxu0 0
  %2363 = vmatpush1.bf16.msra.mxu0 %v1818
  %2364 = vmatprep.subr.bf16.mxu0 0
  %2365 = vmatpush1.bf16.msra.mxu0 %v1819
  %2366 = vmatprep.subr.bf16.mxu0 0
  %2367 = vmatpush1.bf16.msra.mxu0 %v1820
  %2368 = vmatprep.subr.bf16.mxu0 0
  %2369 = vmatpush1.bf16.msra.mxu0 %v1821
  %2370 = vmatprep.subr.bf16.mxu0 0
  %2371 = vmatpush1.bf16.msra.mxu0 %v1822
  %2372 = vmatprep.subr.bf16.mxu0 0
  %2373 = vmatpush1.bf16.msra.mxu0 %v1823
  %2374 = vmatprep.subr.bf16.mxu0 0
  %2375 = vmatpush1.bf16.msra.mxu0 %v1824
  %2376 = vmatprep.subr.bf16.mxu0 0
  %2377 = vmatpush1.bf16.msra.mxu0 %v1825
  %2378 = vmatprep.mubr.bf16.mxu0 %v589
  %2379 = vmatmul.mubr.bf16.gmra.mrb[0].mxu0 %v587
  %v2380 = vpop.f32.mrb[0].mxu0
  %v2381 = vadd.f32 %v2341, %v2380
  %v2382 = vpop.f32.mrb[0].mxu0
  %v2383 = vpop.f32.mrb[0].mxu0
  %v2384 = vpop.f32.mrb[0].mxu0
  %2385 = vdwg.mxu0
  %2386 = vmatprep.subr.bf16.mxu0 0
  %2387 = vmatpush1.bf16.msra.mxu0 %v1826
  %2388 = vmatprep.subr.bf16.mxu0 0
  %2389 = vmatpush1.bf16.msra.mxu0 %v1827
  %2390 = vmatprep.subr.bf16.mxu0 0
  %2391 = vmatpush1.bf16.msra.mxu0 %v1828
  %2392 = vmatprep.subr.bf16.mxu0 0
  %2393 = vmatpush1.bf16.msra.mxu0 %v1829
  %2394 = vmatprep.subr.bf16.mxu0 0
  %2395 = vmatpush1.bf16.msra.mxu0 %v1830
  %2396 = vmatprep.subr.bf16.mxu0 0
  %2397 = vmatpush1.bf16.msra.mxu0 %v1831
  %2398 = vmatprep.subr.bf16.mxu0 0
  %2399 = vmatpush1.bf16.msra.mxu0 %v1832
  %2400 = vmatprep.subr.bf16.mxu0 0
  %2401 = vmatpush1.bf16.msra.mxu0 %v1833
  %2402 = vmatprep.subr.bf16.mxu0 0
  %2403 = vmatpush1.bf16.msra.mxu0 %v1834
  %2404 = vmatprep.subr.bf16.mxu0 0
  %2405 = vmatpush1.bf16.msra.mxu0 %v1835
  %2406 = vmatprep.subr.bf16.mxu0 0
  %2407 = vmatpush1.bf16.msra.mxu0 %v1836
  %2408 = vmatprep.subr.bf16.mxu0 0
  %2409 = vmatpush1.bf16.msra.mxu0 %v1837
  %2410 = vmatprep.subr.bf16.mxu0 0
  %2411 = vmatpush1.bf16.msra.mxu0 %v1838
  %2412 = vmatprep.subr.bf16.mxu0 0
  %2413 = vmatpush1.bf16.msra.mxu0 %v1839
  %2414 = vmatprep.subr.bf16.mxu0 0
  %2415 = vmatpush1.bf16.msra.mxu0 %v1840
  %2416 = vmatprep.subr.bf16.mxu0 0
  %2417 = vmatpush1.bf16.msra.mxu0 %v1841
  %2418 = vmatprep.mubr.bf16.mxu0 %v586
  %2419 = vmatmul.mubr.bf16.gmra.mrb[0].mxu0 %v572
  %v2420 = vpop.f32.mrb[0].mxu0
  %v2421 = vadd.f32 %v2381, %v2420
  %v2422 = vpop.f32.mrb[0].mxu0
  %v2423 = vpop.f32.mrb[0].mxu0
  %v2424 = vpop.f32.mrb[0].mxu0
  %2425 = vdwg.mxu0
  %2426 = vmatprep.subr.bf16.mxu0 0
  %2427 = vmatpush1.bf16.msra.mxu0 %v1842
  %2428 = vmatprep.subr.bf16.mxu0 0
  %2429 = vmatpush1.bf16.msra.mxu0 %v1843
  %2430 = vmatprep.subr.bf16.mxu0 0
  %2431 = vmatpush1.bf16.msra.mxu0 %v1844
  %2432 = vmatprep.subr.bf16.mxu0 0
  %2433 = vmatpush1.bf16.msra.mxu0 %v1845
  %2434 = vmatprep.subr.bf16.mxu0 0
  %2435 = vmatpush1.bf16.msra.mxu0 %v1846
  %2436 = vmatprep.subr.bf16.mxu0 0
  %2437 = vmatpush1.bf16.msra.mxu0 %v1847
  %2438 = vmatprep.subr.bf16.mxu0 0
  %2439 = vmatpush1.bf16.msra.mxu0 %v1848
  %2440 = vmatprep.subr.bf16.mxu0 0
  %2441 = vmatpush1.bf16.msra.mxu0 %v1849
  %2442 = vmatprep.subr.bf16.mxu0 0
  %2443 = vmatpush1.bf16.msra.mxu0 %v1850
  %2444 = vmatprep.subr.bf16.mxu0 0
  %2445 = vmatpush1.bf16.msra.mxu0 %v1851
  %2446 = vmatprep.subr.bf16.mxu0 0
  %2447 = vmatpush1.bf16.msra.mxu0 %v1852
  %2448 = vmatprep.subr.bf16.mxu0 0
  %2449 = vmatpush1.bf16.msra.mxu0 %v1853
  %2450 = vmatprep.subr.bf16.mxu0 0
  %2451 = vmatpush1.bf16.msra.mxu0 %v1854
  %2452 = vmatprep.subr.bf16.mxu0 0
  %2453 = vmatpush1.bf16.msra.mxu0 %v1855
  %2454 = vmatprep.subr.bf16.mxu0 0
  %2455 = vmatpush1.bf16.msra.mxu0 %v1856
  %2456 = vmatprep.subr.bf16.mxu0 0
  %2457 = vmatpush1.bf16.msra.mxu0 %v1857
  %2458 = vmatprep.mubr.bf16.mxu0 %v590
  %2459 = vmatmul.mubr.bf16.gmra.mrb[0].mxu0 %v588
  %v2460 = vpop.f32.mrb[0].mxu0
  %v2461 = vadd.f32 %v2421, %v2460
  %v2462 = vpop.f32.mrb[0].mxu0
  %v2463 = vpop.f32.mrb[0].mxu0
  %v2464 = vpop.f32.mrb[0].mxu0
  %2465 = vdwg.mxu0
  %2466 = vmatprep.subr.bf16.mxu0 0
  %2467 = vmatpush1.bf16.msra.mxu0 %v1858
  %2468 = vmatprep.subr.bf16.mxu0 0
  %2469 = vmatpush1.bf16.msra.mxu0 %v1859
  %2470 = vmatprep.subr.bf16.mxu0 0
  %2471 = vmatpush1.bf16.msra.mxu0 %v1860
  %2472 = vmatprep.subr.bf16.mxu0 0
  %2473 = vmatpush1.bf16.msra.mxu0 %v1861
  %2474 = vmatprep.subr.bf16.mxu0 0
  %2475 = vmatpush1.bf16.msra.mxu0 %v1862
  %2476 = vmatprep.subr.bf16.mxu0 0
  %2477 = vmatpush1.bf16.msra.mxu0 %v1863
  %2478 = vmatprep.subr.bf16.mxu0 0
  %2479 = vmatpush1.bf16.msra.mxu0 %v1864
  %2480 = vmatprep.subr.bf16.mxu0 0
  %2481 = vmatpush1.bf16.msra.mxu0 %v1865
  %2482 = vmatprep.subr.bf16.mxu0 0
  %2483 = vmatpush1.bf16.msra.mxu0 %v1866
  %2484 = vmatprep.subr.bf16.mxu0 0
  %2485 = vmatpush1.bf16.msra.mxu0 %v1867
  %2486 = vmatprep.subr.bf16.mxu0 0
  %2487 = vmatpush1.bf16.msra.mxu0 %v1868
  %2488 = vmatprep.subr.bf16.mxu0 0
  %2489 = vmatpush1.bf16.msra.mxu0 %v1869
  %2490 = vmatprep.subr.bf16.mxu0 0
  %2491 = vmatpush1.bf16.msra.mxu0 %v1870
  %2492 = vmatprep.subr.bf16.mxu0 0
  %2493 = vmatpush1.bf16.msra.mxu0 %v1871
  %2494 = vmatprep.subr.bf16.mxu0 0
  %2495 = vmatpush1.bf16.msra.mxu0 %v1872
  %2496 = vmatprep.subr.bf16.mxu0 0
  %2497 = vmatpush1.bf16.msra.mxu0 %v1873
  %2498 = vmatprep.mubr.bf16.mxu0 %v628
  %2499 = vmatmul.mubr.bf16.gmra.mrb[0].mxu0 %v614
  %v2500 = vpop.f32.mrb[0].mxu0
  %v2501 = vadd.f32 %v2461, %v2500
  %v2502 = vpop.f32.mrb[0].mxu0
  %v2503 = vpop.f32.mrb[0].mxu0
  %v2504 = vpop.f32.mrb[0].mxu0
  %2505 = vdwg.mxu0
  %2506 = vmatprep.subr.bf16.mxu0 0
  %2507 = vmatpush1.bf16.msra.mxu0 %v1874
  %2508 = vmatprep.subr.bf16.mxu0 0
  %2509 = vmatpush1.bf16.msra.mxu0 %v1875
  %2510 = vmatprep.subr.bf16.mxu0 0
  %2511 = vmatpush1.bf16.msra.mxu0 %v1876
  %2512 = vmatprep.subr.bf16.mxu0 0
  %2513 = vmatpush1.bf16.msra.mxu0 %v1877
  %2514 = vmatprep.subr.bf16.mxu0 0
  %2515 = vmatpush1.bf16.msra.mxu0 %v1878
  %2516 = vmatprep.subr.bf16.mxu0 0
  %2517 = vmatpush1.bf16.msra.mxu0 %v1879
  %2518 = vmatprep.subr.bf16.mxu0 0
  %2519 = vmatpush1.bf16.msra.mxu0 %v1880
  %2520 = vmatprep.subr.bf16.mxu0 0
  %2521 = vmatpush1.bf16.msra.mxu0 %v1881
  %2522 = vmatprep.subr.bf16.mxu0 0
  %2523 = vmatpush1.bf16.msra.mxu0 %v1882
  %2524 = vmatprep.subr.bf16.mxu0 0
  %2525 = vmatpush1.bf16.msra.mxu0 %v1883
  %2526 = vmatprep.subr.bf16.mxu0 0
  %2527 = vmatpush1.bf16.msra.mxu0 %v1884
  %2528 = vmatprep.subr.bf16.mxu0 0
  %2529 = vmatpush1.bf16.msra.mxu0 %v1885
  %2530 = vmatprep.subr.bf16.mxu0 0
  %2531 = vmatpush1.bf16.msra.mxu0 %v1886
  %2532 = vmatprep.subr.bf16.mxu0 0
  %2533 = vmatpush1.bf16.msra.mxu0 %v1887
  %2534 = vmatprep.subr.bf16.mxu0 0
  %2535 = vmatpush1.bf16.msra.mxu0 %v1888
  %2536 = vmatprep.subr.bf16.mxu0 0
  %2537 = vmatpush1.bf16.msra.mxu0 %v1889
  %2538 = vmatprep.mubr.bf16.mxu0 %v638
  %2539 = vmatmul.mubr.bf16.gmra.mrb[0].mxu0 %v636
  %v2540 = vpop.f32.mrb[0].mxu0
  %v2541 = vadd.f32 %v2501, %v2540
  %v2542 = vpop.f32.mrb[0].mxu0
  %v2543 = vpop.f32.mrb[0].mxu0
  %v2544 = vpop.f32.mrb[0].mxu0
  %2545 = vdwg.mxu0
  %2546 = vmatprep.subr.bf16.mxu0 0
  %2547 = vmatpush1.bf16.msra.mxu0 %v1890
  %2548 = vmatprep.subr.bf16.mxu0 0
  %2549 = vmatpush1.bf16.msra.mxu0 %v1891
  %2550 = vmatprep.subr.bf16.mxu0 0
  %2551 = vmatpush1.bf16.msra.mxu0 %v1892
  %2552 = vmatprep.subr.bf16.mxu0 0
  %2553 = vmatpush1.bf16.msra.mxu0 %v1893
  %2554 = vmatprep.subr.bf16.mxu0 0
  %2555 = vmatpush1.bf16.msra.mxu0 %v1894
  %2556 = vmatprep.subr.bf16.mxu0 0
  %2557 = vmatpush1.bf16.msra.mxu0 %v1895
  %2558 = vmatprep.subr.bf16.mxu0 0
  %2559 = vmatpush1.bf16.msra.mxu0 %v1896
  %2560 = vmatprep.subr.bf16.mxu0 0
  %2561 = vmatpush1.bf16.msra.mxu0 %v1897
  %2562 = vmatprep.subr.bf16.mxu0 0
  %2563 = vmatpush1.bf16.msra.mxu0 %v1898
  %2564 = vmatprep.subr.bf16.mxu0 0
  %2565 = vmatpush1.bf16.msra.mxu0 %v1899
  %2566 = vmatprep.subr.bf16.mxu0 0
  %2567 = vmatpush1.bf16.msra.mxu0 %v1900
  %2568 = vmatprep.subr.bf16.mxu0 0
  %2569 = vmatpush1.bf16.msra.mxu0 %v1901
  %2570 = vmatprep.subr.bf16.mxu0 0
  %2571 = vmatpush1.bf16.msra.mxu0 %v1902
  %2572 = vmatprep.subr.bf16.mxu0 0
  %2573 = vmatpush1.bf16.msra.mxu0 %v1903
  %2574 = vmatprep.subr.bf16.mxu0 0
  %2575 = vmatpush1.bf16.msra.mxu0 %v1904
  %2576 = vmatprep.subr.bf16.mxu0 0
  %2577 = vmatpush1.bf16.msra.mxu0 %v1905
  %2578 = vmatprep.mubr.bf16.mxu0 %v635
  %2579 = vmatmul.mubr.bf16.gmra.mrb[0].mxu0 %v621
  %v2580 = vpop.f32.mrb[0].mxu0
  %v2581 = vadd.f32 %v2541, %v2580
  %v2582 = vpop.f32.mrb[0].mxu0
  %v2583 = vpop.f32.mrb[0].mxu0
  %v2584 = vpop.f32.mrb[0].mxu0
  %2585 = vdwg.mxu0
  %2586 = vmatprep.subr.bf16.mxu0 0
  %2587 = vmatpush1.bf16.msra.mxu0 %v1906
  %2588 = vmatprep.subr.bf16.mxu0 0
  %2589 = vmatpush1.bf16.msra.mxu0 %v1907
  %2590 = vmatprep.subr.bf16.mxu0 0
  %2591 = vmatpush1.bf16.msra.mxu0 %v1908
  %2592 = vmatprep.subr.bf16.mxu0 0
  %2593 = vmatpush1.bf16.msra.mxu0 %v1909
  %2594 = vmatprep.subr.bf16.mxu0 0
  %2595 = vmatpush1.bf16.msra.mxu0 %v1910
  %2596 = vmatprep.subr.bf16.mxu0 0
  %2597 = vmatpush1.bf16.msra.mxu0 %v1911
  %2598 = vmatprep.subr.bf16.mxu0 0
  %2599 = vmatpush1.bf16.msra.mxu0 %v1912
  %2600 = vmatprep.subr.bf16.mxu0 0
  %2601 = vmatpush1.bf16.msra.mxu0 %v1913
  %2602 = vmatprep.subr.bf16.mxu0 0
  %2603 = vmatpush1.bf16.msra.mxu0 %v1914
  %2604 = vmatprep.subr.bf16.mxu0 0
  %2605 = vmatpush1.bf16.msra.mxu0 %v1915
  %2606 = vmatprep.subr.bf16.mxu0 0
  %2607 = vmatpush1.bf16.msra.mxu0 %v1916
  %2608 = vmatprep.subr.bf16.mxu0 0
  %2609 = vmatpush1.bf16.msra.mxu0 %v1917
  %2610 = vmatprep.subr.bf16.mxu0 0
  %2611 = vmatpush1.bf16.msra.mxu0 %v1918
  %2612 = vmatprep.subr.bf16.mxu0 0
  %2613 = vmatpush1.bf16.msra.mxu0 %v1919
  %2614 = vmatprep.subr.bf16.mxu0 0
  %2615 = vmatpush1.bf16.msra.mxu0 %v1920
  %2616 = vmatprep.subr.bf16.mxu0 0
  %2617 = vmatpush1.bf16.msra.mxu0 %v1921
  %2618 = vmatprep.mubr.bf16.mxu0 %v639
  %2619 = vmatmul.mubr.bf16.gmra.mrb[0].mxu0 %v637
  %v2620 = vpop.f32.mrb[0].mxu0
  %v2621 = vadd.f32 %v2581, %v2620
  %v2622 = vpop.f32.mrb[0].mxu0
  %v2623 = vpop.f32.mrb[0].mxu0
  %v2624 = vpop.f32.mrb[0].mxu0
  %2625 = vdwg.mxu0
  %2626 = vmatprep.subr.bf16.mxu0 0
  %2627 = vmatpush1.bf16.msra.mxu0 %v1922
  %2628 = vmatprep.subr.bf16.mxu0 0
  %2629 = vmatpush1.bf16.msra.mxu0 %v1923
  %2630 = vmatprep.subr.bf16.mxu0 0
  %2631 = vmatpush1.bf16.msra.mxu0 %v1924
  %2632 = vmatprep.subr.bf16.mxu0 0
  %2633 = vmatpush1.bf16.msra.mxu0 %v1925
  %2634 = vmatprep.subr.bf16.mxu0 0
  %2635 = vmatpush1.bf16.msra.mxu0 %v1926
  %2636 = vmatprep.subr.bf16.mxu0 0
  %2637 = vmatpush1.bf16.msra.mxu0 %v1927
  %2638 = vmatprep.subr.bf16.mxu0 0
  %2639 = vmatpush1.bf16.msra.mxu0 %v1928
  %2640 = vmatprep.subr.bf16.mxu0 0
  %2641 = vmatpush1.bf16.msra.mxu0 %v1929
  %2642 = vmatprep.subr.bf16.mxu0 0
  %2643 = vmatpush1.bf16.msra.mxu0 %v1930
  %2644 = vmatprep.subr.bf16.mxu0 0
  %2645 = vmatpush1.bf16.msra.mxu0 %v1931
  %2646 = vmatprep.subr.bf16.mxu0 0
  %2647 = vmatpush1.bf16.msra.mxu0 %v1932
  %2648 = vmatprep.subr.bf16.mxu0 0
  %2649 = vmatpush1.bf16.msra.mxu0 %v1933
  %2650 = vmatprep.subr.bf16.mxu0 0
  %2651 = vmatpush1.bf16.msra.mxu0 %v1934
  %2652 = vmatprep.subr.bf16.mxu0 0
  %2653 = vmatpush1.bf16.msra.mxu0 %v1935
  %2654 = vmatprep.subr.bf16.mxu0 0
  %2655 = vmatpush1.bf16.msra.mxu0 %v1936
  %2656 = vmatprep.subr.bf16.mxu0 0
  %2657 = vmatpush1.bf16.msra.mxu0 %v1937
  %2658 = vmatprep.mubr.bf16.mxu0 %v677
  %2659 = vmatmul.mubr.bf16.gmra.mrb[0].mxu0 %v663
  %v2660 = vpop.f32.mrb[0].mxu0
  %v2661 = vadd.f32 %v2621, %v2660
  %v2662 = vpop.f32.mrb[0].mxu0
  %v2663 = vpop.f32.mrb[0].mxu0
  %v2664 = vpop.f32.mrb[0].mxu0
  %2665 = vdwg.mxu0
  %2666 = vmatprep.subr.bf16.mxu0 0
  %2667 = vmatpush1.bf16.msra.mxu0 %v1938
  %2668 = vmatprep.subr.bf16.mxu0 0
  %2669 = vmatpush1.bf16.msra.mxu0 %v1939
  %2670 = vmatprep.subr.bf16.mxu0 0
  %2671 = vmatpush1.bf16.msra.mxu0 %v1940
  %2672 = vmatprep.subr.bf16.mxu0 0
  %2673 = vmatpush1.bf16.msra.mxu0 %v1941
  %2674 = vmatprep.subr.bf16.mxu0 0
  %2675 = vmatpush1.bf16.msra.mxu0 %v1942
  %2676 = vmatprep.subr.bf16.mxu0 0
  %2677 = vmatpush1.bf16.msra.mxu0 %v1943
  %2678 = vmatprep.subr.bf16.mxu0 0
  %2679 = vmatpush1.bf16.msra.mxu0 %v1944
  %2680 = vmatprep.subr.bf16.mxu0 0
  %2681 = vmatpush1.bf16.msra.mxu0 %v1945
  %2682 = vmatprep.subr.bf16.mxu0 0
  %2683 = vmatpush1.bf16.msra.mxu0 %v1946
  %2684 = vmatprep.subr.bf16.mxu0 0
  %2685 = vmatpush1.bf16.msra.mxu0 %v1947
  %2686 = vmatprep.subr.bf16.mxu0 0
  %2687 = vmatpush1.bf16.msra.mxu0 %v1948
  %2688 = vmatprep.subr.bf16.mxu0 0
  %2689 = vmatpush1.bf16.msra.mxu0 %v1949
  %2690 = vmatprep.subr.bf16.mxu0 0
  %2691 = vmatpush1.bf16.msra.mxu0 %v1950
  %2692 = vmatprep.subr.bf16.mxu0 0
  %2693 = vmatpush1.bf16.msra.mxu0 %v1951
  %2694 = vmatprep.subr.bf16.mxu0 0
  %2695 = vmatpush1.bf16.msra.mxu0 %v1952
  %2696 = vmatprep.subr.bf16.mxu0 0
  %2697 = vmatpush1.bf16.msra.mxu0 %v1953
  %2698 = vmatprep.mubr.bf16.mxu0 %v687
  %2699 = vmatmul.mubr.bf16.gmra.mrb[0].mxu0 %v685
  %v2700 = vpop.f32.mrb[0].mxu0
  %v2701 = vadd.f32 %v2661, %v2700
  %v2702 = vpop.f32.mrb[0].mxu0
  %v2703 = vpop.f32.mrb[0].mxu0
  %v2704 = vpop.f32.mrb[0].mxu0
  %2705 = vdwg.mxu0
  %2706 = vmatprep.subr.bf16.mxu0 0
  %2707 = vmatpush1.bf16.msra.mxu0 %v1954
  %2708 = vmatprep.subr.bf16.mxu0 0
  %2709 = vmatpush1.bf16.msra.mxu0 %v1955
  %2710 = vmatprep.subr.bf16.mxu0 0
  %2711 = vmatpush1.bf16.msra.mxu0 %v1956
  %2712 = vmatprep.subr.bf16.mxu0 0
  %2713 = vmatpush1.bf16.msra.mxu0 %v1957
  %2714 = vmatprep.subr.bf16.mxu0 0
  %2715 = vmatpush1.bf16.msra.mxu0 %v1958
  %2716 = vmatprep.subr.bf16.mxu0 0
  %2717 = vmatpush1.bf16.msra.mxu0 %v1959
  %2718 = vmatprep.subr.bf16.mxu0 0
  %2719 = vmatpush1.bf16.msra.mxu0 %v1960
  %2720 = vmatprep.subr.bf16.mxu0 0
  %2721 = vmatpush1.bf16.msra.mxu0 %v1961
  %2722 = vmatprep.subr.bf16.mxu0 0
  %2723 = vmatpush1.bf16.msra.mxu0 %v1962
  %2724 = vmatprep.subr.bf16.mxu0 0
  %2725 = vmatpush1.bf16.msra.mxu0 %v1963
  %2726 = vmatprep.subr.bf16.mxu0 0
  %2727 = vmatpush1.bf16.msra.mxu0 %v1964
  %2728 = vmatprep.subr.bf16.mxu0 0
  %2729 = vmatpush1.bf16.msra.mxu0 %v1965
  %2730 = vmatprep.subr.bf16.mxu0 0
  %2731 = vmatpush1.bf16.msra.mxu0 %v1966
  %2732 = vmatprep.subr.bf16.mxu0 0
  %2733 = vmatpush1.bf16.msra.mxu0 %v1967
  %2734 = vmatprep.subr.bf16.mxu0 0
  %2735 = vmatpush1.bf16.msra.mxu0 %v1968
  %2736 = vmatprep.subr.bf16.mxu0 0
  %2737 = vmatpush1.bf16.msra.mxu0 %v1969
  %2738 = vmatprep.mubr.bf16.mxu0 %v684
  %2739 = vmatmul.mubr.bf16.gmra.mrb[0].mxu0 %v670
  %v2740 = vpop.f32.mrb[0].mxu0
  %v2741 = vadd.f32 %v2701, %v2740
  %v2742 = vpop.f32.mrb[0].mxu0
  %v2743 = vpop.f32.mrb[0].mxu0
  %v2744 = vpop.f32.mrb[0].mxu0
  %2745 = vdwg.mxu0
  %2746 = vmatprep.subr.bf16.mxu0 0
  %2747 = vmatpush1.bf16.msra.mxu0 %v1970
  %2748 = vmatprep.subr.bf16.mxu0 0
  %2749 = vmatpush1.bf16.msra.mxu0 %v1971
  %2750 = vmatprep.subr.bf16.mxu0 0
  %2751 = vmatpush1.bf16.msra.mxu0 %v1972
  %2752 = vmatprep.subr.bf16.mxu0 0
  %2753 = vmatpush1.bf16.msra.mxu0 %v1973
  %2754 = vmatprep.subr.bf16.mxu0 0
  %2755 = vmatpush1.bf16.msra.mxu0 %v1974
  %2756 = vmatprep.subr.bf16.mxu0 0
  %2757 = vmatpush1.bf16.msra.mxu0 %v1975
  %2758 = vmatprep.subr.bf16.mxu0 0
  %2759 = vmatpush1.bf16.msra.mxu0 %v1976
  %2760 = vmatprep.subr.bf16.mxu0 0
  %2761 = vmatpush1.bf16.msra.mxu0 %v1977
  %2762 = vmatprep.subr.bf16.mxu0 0
  %2763 = vmatpush1.bf16.msra.mxu0 %v1978
  %2764 = vmatprep.subr.bf16.mxu0 0
  %2765 = vmatpush1.bf16.msra.mxu0 %v1979
  %2766 = vmatprep.subr.bf16.mxu0 0
  %2767 = vmatpush1.bf16.msra.mxu0 %v1980
  %2768 = vmatprep.subr.bf16.mxu0 0
  %2769 = vmatpush1.bf16.msra.mxu0 %v1981
  %2770 = vmatprep.subr.bf16.mxu0 0
  %2771 = vmatpush1.bf16.msra.mxu0 %v1982
  %2772 = vmatprep.subr.bf16.mxu0 0
  %2773 = vmatpush1.bf16.msra.mxu0 %v1983
  %2774 = vmatprep.subr.bf16.mxu0 0
  %2775 = vmatpush1.bf16.msra.mxu0 %v1984
  %2776 = vmatprep.subr.bf16.mxu0 0
  %2777 = vmatpush1.bf16.msra.mxu0 %v1985
  %2778 = vmatprep.mubr.bf16.mxu0 %v688
  %2779 = vmatmul.mubr.bf16.gmra.mrb[0].mxu0 %v686
  %v2780 = vpop.f32.mrb[0].mxu0
  %v2781 = vadd.f32 %v2741, %v2780
  %v2782 = vpop.f32.mrb[0].mxu0
  %v2783 = vpop.f32.mrb[0].mxu0
  %v2784 = vpop.f32.mrb[0].mxu0
  %2785 = vdwg.mxu0
  %2786 = vmatprep.subr.bf16.mxu0 0
  %2787 = vmatpush1.bf16.msra.mxu0 %v1986
  %2788 = vmatprep.subr.bf16.mxu0 0
  %2789 = vmatpush1.bf16.msra.mxu0 %v1987
  %2790 = vmatprep.subr.bf16.mxu0 0
  %2791 = vmatpush1.bf16.msra.mxu0 %v1988
  %2792 = vmatprep.subr.bf16.mxu0 0
  %2793 = vmatpush1.bf16.msra.mxu0 %v1989
  %2794 = vmatprep.subr.bf16.mxu0 0
  %2795 = vmatpush1.bf16.msra.mxu0 %v1990
  %2796 = vmatprep.subr.bf16.mxu0 0
  %2797 = vmatpush1.bf16.msra.mxu0 %v1991
  %2798 = vmatprep.subr.bf16.mxu0 0
  %2799 = vmatpush1.bf16.msra.mxu0 %v1992
  %2800 = vmatprep.subr.bf16.mxu0 0
  %2801 = vmatpush1.bf16.msra.mxu0 %v1993
  %2802 = vmatprep.subr.bf16.mxu0 0
  %2803 = vmatpush1.bf16.msra.mxu0 %v1994
  %2804 = vmatprep.subr.bf16.mxu0 0
  %2805 = vmatpush1.bf16.msra.mxu0 %v1995
  %2806 = vmatprep.subr.bf16.mxu0 0
  %2807 = vmatpush1.bf16.msra.mxu0 %v1996
  %2808 = vmatprep.subr.bf16.mxu0 0
  %2809 = vmatpush1.bf16.msra.mxu0 %v1997
  %2810 = vmatprep.subr.bf16.mxu0 0
  %2811 = vmatpush1.bf16.msra.mxu0 %v1998
  %2812 = vmatprep.subr.bf16.mxu0 0
  %2813 = vmatpush1.bf16.msra.mxu0 %v1999
  %2814 = vmatprep.subr.bf16.mxu0 0
  %2815 = vmatpush1.bf16.msra.mxu0 %v2000
  %2816 = vmatprep.subr.bf16.mxu0 0
  %2817 = vmatpush1.bf16.msra.mxu0 %v2001
  %2818 = vmatprep.mubr.bf16.mxu0 %v726
  %2819 = vmatmul.mubr.bf16.gmra.mrb[0].mxu0 %v712
  %v2820 = vpop.f32.mrb[0].mxu0
  %v2821 = vadd.f32 %v2781, %v2820
  %v2822 = vpop.f32.mrb[0].mxu0
  %v2823 = vpop.f32.mrb[0].mxu0
  %v2824 = vpop.f32.mrb[0].mxu0
  %2825 = vdwg.mxu0
  %2826 = vmatprep.subr.bf16.mxu0 0
  %2827 = vmatpush1.bf16.msra.mxu0 %v2002
  %2828 = vmatprep.subr.bf16.mxu0 0
  %2829 = vmatpush1.bf16.msra.mxu0 %v2003
  %2830 = vmatprep.subr.bf16.mxu0 0
  %2831 = vmatpush1.bf16.msra.mxu0 %v2004
  %2832 = vmatprep.subr.bf16.mxu0 0
  %2833 = vmatpush1.bf16.msra.mxu0 %v2005
  %2834 = vmatprep.subr.bf16.mxu0 0
  %2835 = vmatpush1.bf16.msra.mxu0 %v2006
  %2836 = vmatprep.subr.bf16.mxu0 0
  %2837 = vmatpush1.bf16.msra.mxu0 %v2007
  %2838 = vmatprep.subr.bf16.mxu0 0
  %2839 = vmatpush1.bf16.msra.mxu0 %v2008
  %2840 = vmatprep.subr.bf16.mxu0 0
  %2841 = vmatpush1.bf16.msra.mxu0 %v2009
  %2842 = vmatprep.subr.bf16.mxu0 0
  %2843 = vmatpush1.bf16.msra.mxu0 %v2010
  %2844 = vmatprep.subr.bf16.mxu0 0
  %2845 = vmatpush1.bf16.msra.mxu0 %v2011
  %2846 = vmatprep.subr.bf16.mxu0 0
  %2847 = vmatpush1.bf16.msra.mxu0 %v2012
  %2848 = vmatprep.subr.bf16.mxu0 0
  %2849 = vmatpush1.bf16.msra.mxu0 %v2013
  %2850 = vmatprep.subr.bf16.mxu0 0
  %2851 = vmatpush1.bf16.msra.mxu0 %v2014
  %2852 = vmatprep.subr.bf16.mxu0 0
  %2853 = vmatpush1.bf16.msra.mxu0 %v2015
  %2854 = vmatprep.subr.bf16.mxu0 0
  %2855 = vmatpush1.bf16.msra.mxu0 %v2016
  %2856 = vmatprep.subr.bf16.mxu0 0
  %2857 = vmatpush1.bf16.msra.mxu0 %v2017
  %2858 = vmatprep.mubr.bf16.mxu0 %v736
  %2859 = vmatmul.mubr.bf16.gmra.mrb[0].mxu0 %v734
  %v2860 = vpop.f32.mrb[0].mxu0
  %v2861 = vadd.f32 %v2821, %v2860
  %v2862 = vpop.f32.mrb[0].mxu0
  %v2863 = vpop.f32.mrb[0].mxu0
  %v2864 = vpop.f32.mrb[0].mxu0
  %2865 = vdwg.mxu0
  %2866 = vmatprep.subr.bf16.mxu0 0
  %2867 = vmatpush1.bf16.msra.mxu0 %v2018
  %2868 = vmatprep.subr.bf16.mxu0 0
  %2869 = vmatpush1.bf16.msra.mxu0 %v2019
  %2870 = vmatprep.subr.bf16.mxu0 0
  %2871 = vmatpush1.bf16.msra.mxu0 %v2020
  %2872 = vmatprep.subr.bf16.mxu0 0
  %2873 = vmatpush1.bf16.msra.mxu0 %v2021
  %2874 = vmatprep.subr.bf16.mxu0 0
  %2875 = vmatpush1.bf16.msra.mxu0 %v2022
  %2876 = vmatprep.subr.bf16.mxu0 0
  %2877 = vmatpush1.bf16.msra.mxu0 %v2023
  %2878 = vmatprep.subr.bf16.mxu0 0
  %2879 = vmatpush1.bf16.msra.mxu0 %v2024
  %2880 = vmatprep.subr.bf16.mxu0 0
  %2881 = vmatpush1.bf16.msra.mxu0 %v2025
  %2882 = vmatprep.subr.bf16.mxu0 0
  %2883 = vmatpush1.bf16.msra.mxu0 %v2026
  %2884 = vmatprep.subr.bf16.mxu0 0
  %2885 = vmatpush1.bf16.msra.mxu0 %v2027
  %2886 = vmatprep.subr.bf16.mxu0 0
  %2887 = vmatpush1.bf16.msra.mxu0 %v2028
  %2888 = vmatprep.subr.bf16.mxu0 0
  %2889 = vmatpush1.bf16.msra.mxu0 %v2029
  %2890 = vmatprep.subr.bf16.mxu0 0
  %2891 = vmatpush1.bf16.msra.mxu0 %v2030
  %2892 = vmatprep.subr.bf16.mxu0 0
  %2893 = vmatpush1.bf16.msra.mxu0 %v2031
  %2894 = vmatprep.subr.bf16.mxu0 0
  %2895 = vmatpush1.bf16.msra.mxu0 %v2032
  %2896 = vmatprep.subr.bf16.mxu0 0
  %2897 = vmatpush1.bf16.msra.mxu0 %v2033
  %2898 = vmatprep.mubr.bf16.mxu0 %v733
  %2899 = vmatmul.mubr.bf16.gmra.mrb[0].mxu0 %v719
  %v2900 = vpop.f32.mrb[0].mxu0
  %v2901 = vadd.f32 %v2861, %v2900
  %v2902 = vpop.f32.mrb[0].mxu0
  %v2903 = vpop.f32.mrb[0].mxu0
  %v2904 = vpop.f32.mrb[0].mxu0
  %2905 = vdwg.mxu0
  %2906 = vmatprep.subr.bf16.mxu0 0
  %2907 = vmatpush1.bf16.msra.mxu0 %v2034
  %2908 = vmatprep.subr.bf16.mxu0 0
  %2909 = vmatpush1.bf16.msra.mxu0 %v2035
  %2910 = vmatprep.subr.bf16.mxu0 0
  %2911 = vmatpush1.bf16.msra.mxu0 %v2036
  %2912 = vmatprep.subr.bf16.mxu0 0
  %2913 = vmatpush1.bf16.msra.mxu0 %v2037
  %2914 = vmatprep.subr.bf16.mxu0 0
  %2915 = vmatpush1.bf16.msra.mxu0 %v2038
  %2916 = vmatprep.subr.bf16.mxu0 0
  %2917 = vmatpush1.bf16.msra.mxu0 %v2039
  %2918 = vmatprep.subr.bf16.mxu0 0
  %2919 = vmatpush1.bf16.msra.mxu0 %v2040
  %2920 = vmatprep.subr.bf16.mxu0 0
  %2921 = vmatpush1.bf16.msra.mxu0 %v2041
  %2922 = vmatprep.subr.bf16.mxu0 0
  %2923 = vmatpush1.bf16.msra.mxu0 %v2042
  %2924 = vmatprep.subr.bf16.mxu0 0
  %2925 = vmatpush1.bf16.msra.mxu0 %v2043
  %2926 = vmatprep.subr.bf16.mxu0 0
  %2927 = vmatpush1.bf16.msra.mxu0 %v2044
  %2928 = vmatprep.subr.bf16.mxu0 0
  %2929 = vmatpush1.bf16.msra.mxu0 %v2045
  %2930 = vmatprep.subr.bf16.mxu0 0
  %2931 = vmatpush1.bf16.msra.mxu0 %v2046
  %2932 = vmatprep.subr.bf16.mxu0 0
  %2933 = vmatpush1.bf16.msra.mxu0 %v2047
  %2934 = vmatprep.subr.bf16.mxu0 0
  %2935 = vmatpush1.bf16.msra.mxu0 %v2048
  %2936 = vmatprep.subr.bf16.mxu0 0
  %2937 = vmatpush1.bf16.msra.mxu0 %v2049
  %2938 = vmatprep.mubr.bf16.mxu0 %v737
  %2939 = vmatmul.mubr.bf16.gmra.mrb[0].mxu0 %v735
  %v2940 = vpop.f32.mrb[0].mxu0
  %v2941 = vadd.f32 %v2901, %v2940
  %v2942 = vpop.f32.mrb[0].mxu0
  %v2943 = vpop.f32.mrb[0].mxu0
  %v2944 = vpop.f32.mrb[0].mxu0
  %2945 = vdwg.mxu0
  %vm2946 = vcmask 517120
  %2947 = vst.msk [vmem:[%s3] sm:$0x3] %vm2946, %v2941
  // Predicated region
  $region14: #{encoder_forward.9} parent=0 // pred_check
    _
  $region15: #{encoder_forward.9} parent=0 // pred_check_branch
    %2949 = sbr.rel (0) target = $region17
  $region16: #{encoder_forward.9} parent=0 // pred_region
    _
  $region17: #{encoder_forward.9} parent=0 // pred_fallthru
    _
  // Predicated region
  $region18: #{encoder_forward.9} parent=0 // pred_check
    _
  $region19: #{encoder_forward.9} parent=0 // pred_check_branch
    %2951 = sbr.rel (0) target = $region21
  $region20: #{encoder_forward.9} parent=0 // pred_region
    _
  $region21: #{encoder_forward.9} parent=0 // pred_fallthru
    _

</llo_original>
